<compile_context>
chip_gen: v6e
topology: v6e:2x2x1
jax: 0.10.0
libtpu: 0.0.40
codegen_flags: <defaults>
</compile_context>

<pallas_src>
import numpy as np
import jax
import jax.numpy as jnp
from jax.experimental import pallas as pl
from jax.experimental.pallas import tpu as pltpu


# ---------------------------------------------------------------------------
# Static tables (numpy, built once at import; pure index bookkeeping)
# ---------------------------------------------------------------------------
def _build_tables():
    # conv1 im2col gather indices: patches[f, p] = x_flat[idx[f, p]],
    # f = c*25 + kh*5 + kw (PyTorch OIHW flattening), p = oh*28 + ow.
    idx = np.empty((75, 784), np.int32)
    for c in range(3):
        for kh in range(5):
            for kw in range(5):
                f = c * 25 + kh * 5 + kw
                for oh in range(28):
                    for ow in range(28):
                        idx[f, oh * 28 + ow] = c * 1024 + (oh + kh) * 32 + (ow + kw)

    # 2x2 average pool, right-multiplied: 784 conv1 positions -> 196 pooled.
    pool1 = np.zeros((784, 196), np.float32)
    for ph in range(14):
        for pw in range(14):
            for di in range(2):
                for dj in range(2):
                    pool1[(2 * ph + di) * 28 + (2 * pw + dj), ph * 14 + pw] = 0.25

    # conv2 tap placement: tap[t, r, q] = 1 iff pooled1 position r feeds conv2
    # output position q through kernel tap t (t = kh*5 + kw, q = oh*10 + ow).
    tap = np.zeros((25, 196, 100), np.float32)
    for kh in range(5):
        for kw in range(5):
            t = kh * 5 + kw
            for oh in range(10):
                for ow in range(10):
                    tap[t, (oh + kh) * 14 + (ow + kw), oh * 10 + ow] = 1.0

    # pool2 + CHW flatten fold: pf[o*100 + pos, o*25 + pooled_pos] = 0.25,
    # so  pooled2_flat(CHW order) = a2_flat @ pf.
    pf = np.zeros((1600, 400), np.float32)
    for o in range(16):
        for ph in range(5):
            for pw in range(5):
                m = o * 25 + ph * 5 + pw
                for di in range(2):
                    for dj in range(2):
                        pf[o * 100 + (2 * ph + di) * 10 + (2 * pw + dj), m] = 0.25
    return idx, pool1, tap, pf


_IDX_NP, _POOL1_NP, _TAP_NP, _PF_NP = _build_tables()

_B_TILE = 8  # images per grid step


# ---------------------------------------------------------------------------
# Fused kernel: conv1 + tanh + pool1 + conv2 + tanh + pool2 + fc1/2/3
# ---------------------------------------------------------------------------
def _lenet5_kernel(patches_ref, w1_ref, b1_ref, pool1_ref, bigm_ref, b2_ref,
                   fc1_ref, fb1_ref, fc2_ref, fb2_ref, fc3_ref, fb3_ref,
                   out_ref):
    bt = patches_ref.shape[0]          # images in this tile
    c1 = w1_ref.shape[0]               # conv1 output channels (6)
    w1 = w1_ref[...]                   # (6, 75)
    b1 = b1_ref[...]                   # (6, 1)
    pool1 = pool1_ref[...]             # (784, 196)

    # conv1 (MXU) + tanh (EUP) + 2x2 avg-pool (MXU), per image; channels on
    # sublanes, flattened spatial on lanes (lane-dense intermediates).
    pooled = []
    for b in range(bt):
        a1 = jnp.tanh(jnp.dot(w1, patches_ref[b],
                              preferred_element_type=jnp.float32) + b1)      # (6, 784)
        pooled.append(jnp.dot(a1, pool1,
                              preferred_element_type=jnp.float32))           # (6, 196)

    # conv2: pool1-output -> im2col -> conv2 weights are folded into one
    # constant operator per input channel (bigm[c]: (196, 16*100)); batch the
    # whole tile into each matmul so M = bt instead of 1.
    z2 = jnp.zeros((bt, bigm_ref.shape[2]), jnp.float32)                     # (bt, 1600)
    for c in range(c1):
        rows = jnp.concatenate([pooled[b][c:c + 1, :] for b in range(bt)],
                               axis=0)                                       # (bt, 196)
        z2 = z2 + jnp.dot(rows, bigm_ref[c],
                          preferred_element_type=jnp.float32)
    a2 = jnp.tanh(z2 + b2_ref[...])                                          # (bt, 1600)

    # pool2 + CHW flatten are folded into fc1's weights; then fc2, fc3.
    h = jnp.dot(a2, fc1_ref[...], preferred_element_type=jnp.float32) + fb1_ref[...]
    h = jnp.maximum(h, 0.0)                                                  # (bt, 128)
    h = jnp.dot(h, fc2_ref[...], preferred_element_type=jnp.float32) + fb2_ref[...]
    h = jnp.maximum(h, 0.0)                                                  # (bt, 128)
    out_ref[...] = jnp.dot(h, fc3_ref[...],
                           preferred_element_type=jnp.float32) + fb3_ref[...]


# ---------------------------------------------------------------------------
# Forward: glue is a single gather (im2col) + weight folding/padding
# ---------------------------------------------------------------------------
def _lenet5_forward(x, params):
    """x: (N, 3, 32, 32) float32 -> logits (N, 10)."""
    (cw1, cb1, cw2, cb2, fw1, fb1, fw2, fb2, fw3, fb3) = params
    n = x.shape[0]
    bt = _B_TILE
    n_pad = ((n + bt - 1) // bt) * bt

    # --- im2col for conv1 as one gather (pure data movement) ---
    if n_pad != n:
        x = jnp.concatenate(
            [x, jnp.zeros((n_pad - n,) + x.shape[1:], x.dtype)], axis=0)
    x_flat = x.reshape(n_pad, 3 * 32 * 32)
    patches = jnp.take(x_flat, jnp.asarray(_IDX_NP), axis=1)   # (n_pad, 75, 784)

    # --- weight preparation (folding + padding to lane-dense shapes) ---
    w1f = cw1.reshape(6, 75)                                    # (6, 75)
    b1c = cb1.reshape(6, 1)                                     # (6, 1)
    pool1 = jnp.asarray(_POOL1_NP)                              # (784, 196)
    w2r = cw2.reshape(16, 6, 25)                                # (o, c, kh*5+kw)
    bigm = jnp.einsum('oct,trq->croq', w2r,
                      jnp.asarray(_TAP_NP)).reshape(6, 196, 1600)
    b2row = jnp.repeat(cb2, 100)[None, :]                       # (1, 1600)
    fc1f = jnp.pad(jnp.asarray(_PF_NP) @ fw1.T, ((0, 0), (0, 8)))   # (1600, 128)
    fb1p = jnp.pad(fb1, (0, 8))[None, :]                        # (1, 128)
    fc2p = jnp.pad(fw2.T, ((0, 8), (0, 44)))                    # (128, 128)
    fb2p = jnp.pad(fb2, (0, 44))[None, :]                       # (1, 128)
    fc3p = jnp.pad(fw3.T, ((0, 44), (0, 118)))                  # (128, 128)
    fb3p = jnp.pad(fb3, (0, 118))[None, :]                      # (1, 128)

    def const(shape):
        return pl.BlockSpec(shape, lambda i: (0,) * len(shape))

    out = pl.pallas_call(
        _lenet5_kernel,
        out_shape=jax.ShapeDtypeStruct((n_pad, 128), jnp.float32),
        grid=(n_pad // bt,),
        in_specs=[
            pl.BlockSpec((bt, 75, 784), lambda i: (i, 0, 0)),   # patches
            const((6, 75)),            # conv1 weights
            const((6, 1)),             # conv1 bias
            const((784, 196)),         # pool1 matrix
            const((6, 196, 1600)),     # folded pool1->im2col->conv2 operator
            const((1, 1600)),          # conv2 bias (broadcast over spatial)
            const((1600, 128)),        # fc1 (with pool2+flatten folded in)
            const((1, 128)),           # fc1 bias
            const((128, 128)),         # fc2
            const((1, 128)),           # fc2 bias
            const((128, 128)),         # fc3
            const((1, 128)),           # fc3 bias
        ],
        out_specs=pl.BlockSpec((bt, 128), lambda i: (i, 0)),
        compiler_params=pltpu.CompilerParams(
            dimension_semantics=("parallel",),
            vmem_limit_bytes=40 * 1024 * 1024),
    )(patches, w1f, b1c, pool1, bigm, b2row,
      fc1f, fb1p, fc2p, fb2p, fc3p, fb3p)

    return out[:n, :10]


lenet5_forward = jax.jit(_lenet5_forward)


# ---------------------------------------------------------------------------
# Pure-JAX reference (for correctness check)
# ---------------------------------------------------------------------------
def lenet5_ref(x, params):
    (cw1, cb1, cw2, cb2, fw1, fb1, fw2, fb2, fw3, fb3) = params

    def conv(y, w, b):
        out = jax.lax.conv_general_dilated(
            y, w, (1, 1), 'VALID', dimension_numbers=('NCHW', 'OIHW', 'NCHW'))
        return out + b[None, :, None, None]

    def pool(y):
        n, c, h, w = y.shape
        return y.reshape(n, c, h // 2, 2, w // 2, 2).mean(axis=(3, 5))

    y = pool(jnp.tanh(conv(x, cw1, cb1)))
    y = pool(jnp.tanh(conv(y, cw2, cb2)))
    y = y.reshape(y.shape[0], -1)
    y = jnp.maximum(y @ fw1.T + fb1, 0.0)
    y = jnp.maximum(y @ fw2.T + fb2, 0.0)
    return y @ fw3.T + fb3


# ---------------------------------------------------------------------------
# Main
# ---------------------------------------------------------------------------
if __name__ == "__main__":
    key = jax.random.PRNGKey(0)
    ks = jax.random.split(key, 11)

    # Deterministic synthetic parameters (shapes from LeNet5.__init__).
    params = (
        0.1 * jax.random.normal(ks[0], (6, 3, 5, 5), jnp.float32),    # conv1.w
        0.1 * jax.random.normal(ks[1], (6,), jnp.float32),            # conv1.b
        0.1 * jax.random.normal(ks[2], (16, 6, 5, 5), jnp.float32),   # conv2.w
        0.1 * jax.random.normal(ks[3], (16,), jnp.float32),           # conv2.b
        0.1 * jax.random.normal(ks[4], (120, 400), jnp.float32),      # fc1.w
        0.1 * jax.random.normal(ks[5], (120,), jnp.float32),          # fc1.b
        0.1 * jax.random.normal(ks[6], (84, 120), jnp.float32),       # fc2.w
        0.1 * jax.random.normal(ks[7], (84,), jnp.float32),           # fc2.b
        0.1 * jax.random.normal(ks[8], (10, 84), jnp.float32),        # fc3.w
        0.1 * jax.random.normal(ks[9], (10,), jnp.float32),           # fc3.b
    )

    # LeNet5's fc1 = 16*5*5 forces 3x32x32 inputs; batch kept small.
    x = jax.random.normal(ks[10], (2, 3, 32, 32), jnp.float32)

    out = jax.block_until_ready(lenet5_forward(x, params))
    ref = jax.block_until_ready(lenet5_ref(x, params))

    assert out.shape == (2, 10), out.shape
    assert bool(jnp.all(jnp.isfinite(out)))
    # Both the kernel and the XLA reference feed f32 operands to the MXU with
    # default precision (bf16-input passes), and the two decompositions round
    # pooled activations at slightly different points, so a few-1e-3-level
    # difference is expected; 3e-2 is a comfortably tight bound for that.
    assert bool(jnp.allclose(out, ref, atol=3e-2, rtol=3e-2)), (
        f"max abs err {float(jnp.max(jnp.abs(out - ref)))}")

    print("KERNEL_OK")
</pallas_src>

<mosaic_0001>
module attributes {stable_mosaic.version = 11 : i64} {
  func.func @_lenet5_kernel(%arg0: i32, %arg1: memref<8x75x784xf32, #tpu.memory_space<vmem>>, %arg2: memref<6x75xf32, #tpu.memory_space<vmem>>, %arg3: memref<6x1xf32, #tpu.memory_space<vmem>>, %arg4: memref<784x196xf32, #tpu.memory_space<vmem>>, %arg5: memref<6x196x1600xf32, #tpu.memory_space<vmem>>, %arg6: memref<1x1600xf32, #tpu.memory_space<vmem>>, %arg7: memref<1600x128xf32, #tpu.memory_space<vmem>>, %arg8: memref<1x128xf32, #tpu.memory_space<vmem>>, %arg9: memref<128x128xf32, #tpu.memory_space<vmem>>, %arg10: memref<1x128xf32, #tpu.memory_space<vmem>>, %arg11: memref<128x128xf32, #tpu.memory_space<vmem>>, %arg12: memref<1x128xf32, #tpu.memory_space<vmem>>, %arg13: memref<8x128xf32, #tpu.memory_space<vmem>>) attributes {dimension_semantics = [#tpu.dimension_semantics<parallel>], iteration_bounds = array<i64: 1>, scalar_prefetch = 0 : i64, scratch_operands = 0 : i64, tpu.core_type = #tpu.core_type<tc>, window_params = [{transform_indices = @transform_0, window_bounds = array<i64: 8, 75, 784>}, {pipeline_mode = #tpu.pipeline_mode<synchronous>, transform_indices = @transform_1, window_bounds = array<i64: 6, 75>}, {pipeline_mode = #tpu.pipeline_mode<synchronous>, transform_indices = @transform_2, window_bounds = array<i64: 6, 1>}, {pipeline_mode = #tpu.pipeline_mode<synchronous>, transform_indices = @transform_3, window_bounds = array<i64: 784, 196>}, {pipeline_mode = #tpu.pipeline_mode<synchronous>, transform_indices = @transform_4, window_bounds = array<i64: 6, 196, 1600>}, {pipeline_mode = #tpu.pipeline_mode<synchronous>, transform_indices = @transform_5, window_bounds = array<i64: 1, 1600>}, {pipeline_mode = #tpu.pipeline_mode<synchronous>, transform_indices = @transform_6, window_bounds = array<i64: 1600, 128>}, {pipeline_mode = #tpu.pipeline_mode<synchronous>, transform_indices = @transform_7, window_bounds = array<i64: 1, 128>}, {pipeline_mode = #tpu.pipeline_mode<synchronous>, transform_indices = @transform_8, window_bounds = array<i64: 128, 128>}, {pipeline_mode = #tpu.pipeline_mode<synchronous>, transform_indices = @transform_9, window_bounds = array<i64: 1, 128>}, {pipeline_mode = #tpu.pipeline_mode<synchronous>, transform_indices = @transform_10, window_bounds = array<i64: 128, 128>}, {pipeline_mode = #tpu.pipeline_mode<synchronous>, transform_indices = @transform_11, window_bounds = array<i64: 1, 128>}, {transform_indices = @transform_12, window_bounds = array<i64: 8, 128>}]} {
    %c0 = arith.constant 0 : index
    %c0_0 = arith.constant 0 : index
    %0 = vector.load %arg2[%c0, %c0_0] : memref<6x75xf32, #tpu.memory_space<vmem>>, vector<6x75xf32>
    %c0_1 = arith.constant 0 : index
    %c0_2 = arith.constant 0 : index
    %1 = vector.load %arg3[%c0_1, %c0_2] : memref<6x1xf32, #tpu.memory_space<vmem>>, vector<6x1xf32>
    %c0_3 = arith.constant 0 : index
    %c0_4 = arith.constant 0 : index
    %2 = vector.load %arg4[%c0_3, %c0_4] : memref<784x196xf32, #tpu.memory_space<vmem>>, vector<784x196xf32>
    %c0_5 = arith.constant 0 : index
    %c0_6 = arith.constant 0 : index
    %c0_7 = arith.constant 0 : index
    %3 = vector.load %arg1[%c0_5, %c0_6, %c0_7] : memref<8x75x784xf32, #tpu.memory_space<vmem>>, vector<1x75x784xf32>
    %4 = vector.shape_cast %3 : vector<1x75x784xf32> to vector<75x784xf32>
    %cst = arith.constant dense<0.000000e+00> : vector<6x784xf32>
    %5 = tpu.matmul %0, %4, %cst {dimension_numbers = #tpu.dot_dimension_numbers<[1], [0], [0], [1], [0, 0, 1, 1], [], []>} : vector<6x75xf32>, vector<75x784xf32>, vector<6x784xf32> -> vector<6x784xf32>
    %6 = vector.broadcast %1 : vector<6x1xf32> to vector<6x784xf32>
    %7 = arith.addf %5, %6 : vector<6x784xf32>
    %8 = math.tanh %7 : vector<6x784xf32>
    %cst_8 = arith.constant dense<0.000000e+00> : vector<6x196xf32>
    %9 = tpu.matmul %8, %2, %cst_8 {dimension_numbers = #tpu.dot_dimension_numbers<[1], [0], [0], [1], [0, 0, 1, 1], [], []>} : vector<6x784xf32>, vector<784x196xf32>, vector<6x196xf32> -> vector<6x196xf32>
    %c1 = arith.constant 1 : index
    %c0_9 = arith.constant 0 : index
    %c0_10 = arith.constant 0 : index
    %10 = vector.load %arg1[%c1, %c0_9, %c0_10] : memref<8x75x784xf32, #tpu.memory_space<vmem>>, vector<1x75x784xf32>
    %11 = vector.shape_cast %10 : vector<1x75x784xf32> to vector<75x784xf32>
    %cst_11 = arith.constant dense<0.000000e+00> : vector<6x784xf32>
    %12 = tpu.matmul %0, %11, %cst_11 {dimension_numbers = #tpu.dot_dimension_numbers<[1], [0], [0], [1], [0, 0, 1, 1], [], []>} : vector<6x75xf32>, vector<75x784xf32>, vector<6x784xf32> -> vector<6x784xf32>
    %13 = vector.broadcast %1 : vector<6x1xf32> to vector<6x784xf32>
    %14 = arith.addf %12, %13 : vector<6x784xf32>
    %15 = math.tanh %14 : vector<6x784xf32>
    %cst_12 = arith.constant dense<0.000000e+00> : vector<6x196xf32>
    %16 = tpu.matmul %15, %2, %cst_12 {dimension_numbers = #tpu.dot_dimension_numbers<[1], [0], [0], [1], [0, 0, 1, 1], [], []>} : vector<6x784xf32>, vector<784x196xf32>, vector<6x196xf32> -> vector<6x196xf32>
    %c2 = arith.constant 2 : index
    %c0_13 = arith.constant 0 : index
    %c0_14 = arith.constant 0 : index
    %17 = vector.load %arg1[%c2, %c0_13, %c0_14] : memref<8x75x784xf32, #tpu.memory_space<vmem>>, vector<1x75x784xf32>
    %18 = vector.shape_cast %17 : vector<1x75x784xf32> to vector<75x784xf32>
    %cst_15 = arith.constant dense<0.000000e+00> : vector<6x784xf32>
    %19 = tpu.matmul %0, %18, %cst_15 {dimension_numbers = #tpu.dot_dimension_numbers<[1], [0], [0], [1], [0, 0, 1, 1], [], []>} : vector<6x75xf32>, vector<75x784xf32>, vector<6x784xf32> -> vector<6x784xf32>
    %20 = vector.broadcast %1 : vector<6x1xf32> to vector<6x784xf32>
    %21 = arith.addf %19, %20 : vector<6x784xf32>
    %22 = math.tanh %21 : vector<6x784xf32>
    %cst_16 = arith.constant dense<0.000000e+00> : vector<6x196xf32>
    %23 = tpu.matmul %22, %2, %cst_16 {dimension_numbers = #tpu.dot_dimension_numbers<[1], [0], [0], [1], [0, 0, 1, 1], [], []>} : vector<6x784xf32>, vector<784x196xf32>, vector<6x196xf32> -> vector<6x196xf32>
    %c3 = arith.constant 3 : index
    %c0_17 = arith.constant 0 : index
    %c0_18 = arith.constant 0 : index
    %24 = vector.load %arg1[%c3, %c0_17, %c0_18] : memref<8x75x784xf32, #tpu.memory_space<vmem>>, vector<1x75x784xf32>
    %25 = vector.shape_cast %24 : vector<1x75x784xf32> to vector<75x784xf32>
    %cst_19 = arith.constant dense<0.000000e+00> : vector<6x784xf32>
    %26 = tpu.matmul %0, %25, %cst_19 {dimension_numbers = #tpu.dot_dimension_numbers<[1], [0], [0], [1], [0, 0, 1, 1], [], []>} : vector<6x75xf32>, vector<75x784xf32>, vector<6x784xf32> -> vector<6x784xf32>
    %27 = vector.broadcast %1 : vector<6x1xf32> to vector<6x784xf32>
    %28 = arith.addf %26, %27 : vector<6x784xf32>
    %29 = math.tanh %28 : vector<6x784xf32>
    %cst_20 = arith.constant dense<0.000000e+00> : vector<6x196xf32>
    %30 = tpu.matmul %29, %2, %cst_20 {dimension_numbers = #tpu.dot_dimension_numbers<[1], [0], [0], [1], [0, 0, 1, 1], [], []>} : vector<6x784xf32>, vector<784x196xf32>, vector<6x196xf32> -> vector<6x196xf32>
    %c4 = arith.constant 4 : index
    %c0_21 = arith.constant 0 : index
    %c0_22 = arith.constant 0 : index
    %31 = vector.load %arg1[%c4, %c0_21, %c0_22] : memref<8x75x784xf32, #tpu.memory_space<vmem>>, vector<1x75x784xf32>
    %32 = vector.shape_cast %31 : vector<1x75x784xf32> to vector<75x784xf32>
    %cst_23 = arith.constant dense<0.000000e+00> : vector<6x784xf32>
    %33 = tpu.matmul %0, %32, %cst_23 {dimension_numbers = #tpu.dot_dimension_numbers<[1], [0], [0], [1], [0, 0, 1, 1], [], []>} : vector<6x75xf32>, vector<75x784xf32>, vector<6x784xf32> -> vector<6x784xf32>
    %34 = vector.broadcast %1 : vector<6x1xf32> to vector<6x784xf32>
    %35 = arith.addf %33, %34 : vector<6x784xf32>
    %36 = math.tanh %35 : vector<6x784xf32>
    %cst_24 = arith.constant dense<0.000000e+00> : vector<6x196xf32>
    %37 = tpu.matmul %36, %2, %cst_24 {dimension_numbers = #tpu.dot_dimension_numbers<[1], [0], [0], [1], [0, 0, 1, 1], [], []>} : vector<6x784xf32>, vector<784x196xf32>, vector<6x196xf32> -> vector<6x196xf32>
    %c5 = arith.constant 5 : index
    %c0_25 = arith.constant 0 : index
    %c0_26 = arith.constant 0 : index
    %38 = vector.load %arg1[%c5, %c0_25, %c0_26] : memref<8x75x784xf32, #tpu.memory_space<vmem>>, vector<1x75x784xf32>
    %39 = vector.shape_cast %38 : vector<1x75x784xf32> to vector<75x784xf32>
    %cst_27 = arith.constant dense<0.000000e+00> : vector<6x784xf32>
    %40 = tpu.matmul %0, %39, %cst_27 {dimension_numbers = #tpu.dot_dimension_numbers<[1], [0], [0], [1], [0, 0, 1, 1], [], []>} : vector<6x75xf32>, vector<75x784xf32>, vector<6x784xf32> -> vector<6x784xf32>
    %41 = vector.broadcast %1 : vector<6x1xf32> to vector<6x784xf32>
    %42 = arith.addf %40, %41 : vector<6x784xf32>
    %43 = math.tanh %42 : vector<6x784xf32>
    %cst_28 = arith.constant dense<0.000000e+00> : vector<6x196xf32>
    %44 = tpu.matmul %43, %2, %cst_28 {dimension_numbers = #tpu.dot_dimension_numbers<[1], [0], [0], [1], [0, 0, 1, 1], [], []>} : vector<6x784xf32>, vector<784x196xf32>, vector<6x196xf32> -> vector<6x196xf32>
    %c6 = arith.constant 6 : index
    %c0_29 = arith.constant 0 : index
    %c0_30 = arith.constant 0 : index
    %45 = vector.load %arg1[%c6, %c0_29, %c0_30] : memref<8x75x784xf32, #tpu.memory_space<vmem>>, vector<1x75x784xf32>
    %46 = vector.shape_cast %45 : vector<1x75x784xf32> to vector<75x784xf32>
    %cst_31 = arith.constant dense<0.000000e+00> : vector<6x784xf32>
    %47 = tpu.matmul %0, %46, %cst_31 {dimension_numbers = #tpu.dot_dimension_numbers<[1], [0], [0], [1], [0, 0, 1, 1], [], []>} : vector<6x75xf32>, vector<75x784xf32>, vector<6x784xf32> -> vector<6x784xf32>
    %48 = vector.broadcast %1 : vector<6x1xf32> to vector<6x784xf32>
    %49 = arith.addf %47, %48 : vector<6x784xf32>
    %50 = math.tanh %49 : vector<6x784xf32>
    %cst_32 = arith.constant dense<0.000000e+00> : vector<6x196xf32>
    %51 = tpu.matmul %50, %2, %cst_32 {dimension_numbers = #tpu.dot_dimension_numbers<[1], [0], [0], [1], [0, 0, 1, 1], [], []>} : vector<6x784xf32>, vector<784x196xf32>, vector<6x196xf32> -> vector<6x196xf32>
    %c7 = arith.constant 7 : index
    %c0_33 = arith.constant 0 : index
    %c0_34 = arith.constant 0 : index
    %52 = vector.load %arg1[%c7, %c0_33, %c0_34] : memref<8x75x784xf32, #tpu.memory_space<vmem>>, vector<1x75x784xf32>
    %53 = vector.shape_cast %52 : vector<1x75x784xf32> to vector<75x784xf32>
    %cst_35 = arith.constant dense<0.000000e+00> : vector<6x784xf32>
    %54 = tpu.matmul %0, %53, %cst_35 {dimension_numbers = #tpu.dot_dimension_numbers<[1], [0], [0], [1], [0, 0, 1, 1], [], []>} : vector<6x75xf32>, vector<75x784xf32>, vector<6x784xf32> -> vector<6x784xf32>
    %55 = vector.broadcast %1 : vector<6x1xf32> to vector<6x784xf32>
    %56 = arith.addf %54, %55 : vector<6x784xf32>
    %57 = math.tanh %56 : vector<6x784xf32>
    %cst_36 = arith.constant dense<0.000000e+00> : vector<6x196xf32>
    %58 = tpu.matmul %57, %2, %cst_36 {dimension_numbers = #tpu.dot_dimension_numbers<[1], [0], [0], [1], [0, 0, 1, 1], [], []>} : vector<6x784xf32>, vector<784x196xf32>, vector<6x196xf32> -> vector<6x196xf32>
    %cst_37 = arith.constant 0.000000e+00 : f32
    %59 = vector.broadcast %cst_37 : f32 to vector<8x1600xf32>
    %60 = vector.extract_strided_slice %9 {offsets = [0, 0], sizes = [1, 196], strides = [1, 1]} : vector<6x196xf32> to vector<1x196xf32>
    %61 = vector.extract_strided_slice %16 {offsets = [0, 0], sizes = [1, 196], strides = [1, 1]} : vector<6x196xf32> to vector<1x196xf32>
    %62 = vector.extract_strided_slice %23 {offsets = [0, 0], sizes = [1, 196], strides = [1, 1]} : vector<6x196xf32> to vector<1x196xf32>
    %63 = vector.extract_strided_slice %30 {offsets = [0, 0], sizes = [1, 196], strides = [1, 1]} : vector<6x196xf32> to vector<1x196xf32>
    %64 = vector.extract_strided_slice %37 {offsets = [0, 0], sizes = [1, 196], strides = [1, 1]} : vector<6x196xf32> to vector<1x196xf32>
    %65 = vector.extract_strided_slice %44 {offsets = [0, 0], sizes = [1, 196], strides = [1, 1]} : vector<6x196xf32> to vector<1x196xf32>
    %66 = vector.extract_strided_slice %51 {offsets = [0, 0], sizes = [1, 196], strides = [1, 1]} : vector<6x196xf32> to vector<1x196xf32>
    %67 = vector.extract_strided_slice %58 {offsets = [0, 0], sizes = [1, 196], strides = [1, 1]} : vector<6x196xf32> to vector<1x196xf32>
    %68 = tpu.concatenate %60, %61, %62, %63, %64, %65, %66, %67 in 0 : vector<1x196xf32>, vector<1x196xf32>, vector<1x196xf32>, vector<1x196xf32>, vector<1x196xf32>, vector<1x196xf32>, vector<1x196xf32>, vector<1x196xf32> -> vector<8x196xf32>
    %c0_38 = arith.constant 0 : index
    %c0_39 = arith.constant 0 : index
    %c0_40 = arith.constant 0 : index
    %69 = vector.load %arg5[%c0_38, %c0_39, %c0_40] : memref<6x196x1600xf32, #tpu.memory_space<vmem>>, vector<1x196x1600xf32>
    %70 = vector.shape_cast %69 : vector<1x196x1600xf32> to vector<196x1600xf32>
    %cst_41 = arith.constant dense<0.000000e+00> : vector<8x1600xf32>
    %71 = tpu.matmul %68, %70, %cst_41 {dimension_numbers = #tpu.dot_dimension_numbers<[1], [0], [0], [1], [0, 0, 1, 1], [], []>} : vector<8x196xf32>, vector<196x1600xf32>, vector<8x1600xf32> -> vector<8x1600xf32>
    %72 = arith.addf %59, %71 : vector<8x1600xf32>
    %73 = vector.extract_strided_slice %9 {offsets = [1, 0], sizes = [1, 196], strides = [1, 1]} : vector<6x196xf32> to vector<1x196xf32>
    %74 = vector.extract_strided_slice %16 {offsets = [1, 0], sizes = [1, 196], strides = [1, 1]} : vector<6x196xf32> to vector<1x196xf32>
    %75 = vector.extract_strided_slice %23 {offsets = [1, 0], sizes = [1, 196], strides = [1, 1]} : vector<6x196xf32> to vector<1x196xf32>
    %76 = vector.extract_strided_slice %30 {offsets = [1, 0], sizes = [1, 196], strides = [1, 1]} : vector<6x196xf32> to vector<1x196xf32>
    %77 = vector.extract_strided_slice %37 {offsets = [1, 0], sizes = [1, 196], strides = [1, 1]} : vector<6x196xf32> to vector<1x196xf32>
    %78 = vector.extract_strided_slice %44 {offsets = [1, 0], sizes = [1, 196], strides = [1, 1]} : vector<6x196xf32> to vector<1x196xf32>
    %79 = vector.extract_strided_slice %51 {offsets = [1, 0], sizes = [1, 196], strides = [1, 1]} : vector<6x196xf32> to vector<1x196xf32>
    %80 = vector.extract_strided_slice %58 {offsets = [1, 0], sizes = [1, 196], strides = [1, 1]} : vector<6x196xf32> to vector<1x196xf32>
    %81 = tpu.concatenate %73, %74, %75, %76, %77, %78, %79, %80 in 0 : vector<1x196xf32>, vector<1x196xf32>, vector<1x196xf32>, vector<1x196xf32>, vector<1x196xf32>, vector<1x196xf32>, vector<1x196xf32>, vector<1x196xf32> -> vector<8x196xf32>
    %c1_42 = arith.constant 1 : index
    %c0_43 = arith.constant 0 : index
    %c0_44 = arith.constant 0 : index
    %82 = vector.load %arg5[%c1_42, %c0_43, %c0_44] : memref<6x196x1600xf32, #tpu.memory_space<vmem>>, vector<1x196x1600xf32>
    %83 = vector.shape_cast %82 : vector<1x196x1600xf32> to vector<196x1600xf32>
    %cst_45 = arith.constant dense<0.000000e+00> : vector<8x1600xf32>
    %84 = tpu.matmul %81, %83, %cst_45 {dimension_numbers = #tpu.dot_dimension_numbers<[1], [0], [0], [1], [0, 0, 1, 1], [], []>} : vector<8x196xf32>, vector<196x1600xf32>, vector<8x1600xf32> -> vector<8x1600xf32>
    %85 = arith.addf %72, %84 : vector<8x1600xf32>
    %86 = vector.extract_strided_slice %9 {offsets = [2, 0], sizes = [1, 196], strides = [1, 1]} : vector<6x196xf32> to vector<1x196xf32>
    %87 = vector.extract_strided_slice %16 {offsets = [2, 0], sizes = [1, 196], strides = [1, 1]} : vector<6x196xf32> to vector<1x196xf32>
    %88 = vector.extract_strided_slice %23 {offsets = [2, 0], sizes = [1, 196], strides = [1, 1]} : vector<6x196xf32> to vector<1x196xf32>
    %89 = vector.extract_strided_slice %30 {offsets = [2, 0], sizes = [1, 196], strides = [1, 1]} : vector<6x196xf32> to vector<1x196xf32>
    %90 = vector.extract_strided_slice %37 {offsets = [2, 0], sizes = [1, 196], strides = [1, 1]} : vector<6x196xf32> to vector<1x196xf32>
    %91 = vector.extract_strided_slice %44 {offsets = [2, 0], sizes = [1, 196], strides = [1, 1]} : vector<6x196xf32> to vector<1x196xf32>
    %92 = vector.extract_strided_slice %51 {offsets = [2, 0], sizes = [1, 196], strides = [1, 1]} : vector<6x196xf32> to vector<1x196xf32>
    %93 = vector.extract_strided_slice %58 {offsets = [2, 0], sizes = [1, 196], strides = [1, 1]} : vector<6x196xf32> to vector<1x196xf32>
    %94 = tpu.concatenate %86, %87, %88, %89, %90, %91, %92, %93 in 0 : vector<1x196xf32>, vector<1x196xf32>, vector<1x196xf32>, vector<1x196xf32>, vector<1x196xf32>, vector<1x196xf32>, vector<1x196xf32>, vector<1x196xf32> -> vector<8x196xf32>
    %c2_46 = arith.constant 2 : index
    %c0_47 = arith.constant 0 : index
    %c0_48 = arith.constant 0 : index
    %95 = vector.load %arg5[%c2_46, %c0_47, %c0_48] : memref<6x196x1600xf32, #tpu.memory_space<vmem>>, vector<1x196x1600xf32>
    %96 = vector.shape_cast %95 : vector<1x196x1600xf32> to vector<196x1600xf32>
    %cst_49 = arith.constant dense<0.000000e+00> : vector<8x1600xf32>
    %97 = tpu.matmul %94, %96, %cst_49 {dimension_numbers = #tpu.dot_dimension_numbers<[1], [0], [0], [1], [0, 0, 1, 1], [], []>} : vector<8x196xf32>, vector<196x1600xf32>, vector<8x1600xf32> -> vector<8x1600xf32>
    %98 = arith.addf %85, %97 : vector<8x1600xf32>
    %99 = vector.extract_strided_slice %9 {offsets = [3, 0], sizes = [1, 196], strides = [1, 1]} : vector<6x196xf32> to vector<1x196xf32>
    %100 = vector.extract_strided_slice %16 {offsets = [3, 0], sizes = [1, 196], strides = [1, 1]} : vector<6x196xf32> to vector<1x196xf32>
    %101 = vector.extract_strided_slice %23 {offsets = [3, 0], sizes = [1, 196], strides = [1, 1]} : vector<6x196xf32> to vector<1x196xf32>
    %102 = vector.extract_strided_slice %30 {offsets = [3, 0], sizes = [1, 196], strides = [1, 1]} : vector<6x196xf32> to vector<1x196xf32>
    %103 = vector.extract_strided_slice %37 {offsets = [3, 0], sizes = [1, 196], strides = [1, 1]} : vector<6x196xf32> to vector<1x196xf32>
    %104 = vector.extract_strided_slice %44 {offsets = [3, 0], sizes = [1, 196], strides = [1, 1]} : vector<6x196xf32> to vector<1x196xf32>
    %105 = vector.extract_strided_slice %51 {offsets = [3, 0], sizes = [1, 196], strides = [1, 1]} : vector<6x196xf32> to vector<1x196xf32>
    %106 = vector.extract_strided_slice %58 {offsets = [3, 0], sizes = [1, 196], strides = [1, 1]} : vector<6x196xf32> to vector<1x196xf32>
    %107 = tpu.concatenate %99, %100, %101, %102, %103, %104, %105, %106 in 0 : vector<1x196xf32>, vector<1x196xf32>, vector<1x196xf32>, vector<1x196xf32>, vector<1x196xf32>, vector<1x196xf32>, vector<1x196xf32>, vector<1x196xf32> -> vector<8x196xf32>
    %c3_50 = arith.constant 3 : index
    %c0_51 = arith.constant 0 : index
    %c0_52 = arith.constant 0 : index
    %108 = vector.load %arg5[%c3_50, %c0_51, %c0_52] : memref<6x196x1600xf32, #tpu.memory_space<vmem>>, vector<1x196x1600xf32>
    %109 = vector.shape_cast %108 : vector<1x196x1600xf32> to vector<196x1600xf32>
    %cst_53 = arith.constant dense<0.000000e+00> : vector<8x1600xf32>
    %110 = tpu.matmul %107, %109, %cst_53 {dimension_numbers = #tpu.dot_dimension_numbers<[1], [0], [0], [1], [0, 0, 1, 1], [], []>} : vector<8x196xf32>, vector<196x1600xf32>, vector<8x1600xf32> -> vector<8x1600xf32>
    %111 = arith.addf %98, %110 : vector<8x1600xf32>
    %112 = vector.extract_strided_slice %9 {offsets = [4, 0], sizes = [1, 196], strides = [1, 1]} : vector<6x196xf32> to vector<1x196xf32>
    %113 = vector.extract_strided_slice %16 {offsets = [4, 0], sizes = [1, 196], strides = [1, 1]} : vector<6x196xf32> to vector<1x196xf32>
    %114 = vector.extract_strided_slice %23 {offsets = [4, 0], sizes = [1, 196], strides = [1, 1]} : vector<6x196xf32> to vector<1x196xf32>
    %115 = vector.extract_strided_slice %30 {offsets = [4, 0], sizes = [1, 196], strides = [1, 1]} : vector<6x196xf32> to vector<1x196xf32>
    %116 = vector.extract_strided_slice %37 {offsets = [4, 0], sizes = [1, 196], strides = [1, 1]} : vector<6x196xf32> to vector<1x196xf32>
    %117 = vector.extract_strided_slice %44 {offsets = [4, 0], sizes = [1, 196], strides = [1, 1]} : vector<6x196xf32> to vector<1x196xf32>
    %118 = vector.extract_strided_slice %51 {offsets = [4, 0], sizes = [1, 196], strides = [1, 1]} : vector<6x196xf32> to vector<1x196xf32>
    %119 = vector.extract_strided_slice %58 {offsets = [4, 0], sizes = [1, 196], strides = [1, 1]} : vector<6x196xf32> to vector<1x196xf32>
    %120 = tpu.concatenate %112, %113, %114, %115, %116, %117, %118, %119 in 0 : vector<1x196xf32>, vector<1x196xf32>, vector<1x196xf32>, vector<1x196xf32>, vector<1x196xf32>, vector<1x196xf32>, vector<1x196xf32>, vector<1x196xf32> -> vector<8x196xf32>
    %c4_54 = arith.constant 4 : index
    %c0_55 = arith.constant 0 : index
    %c0_56 = arith.constant 0 : index
    %121 = vector.load %arg5[%c4_54, %c0_55, %c0_56] : memref<6x196x1600xf32, #tpu.memory_space<vmem>>, vector<1x196x1600xf32>
    %122 = vector.shape_cast %121 : vector<1x196x1600xf32> to vector<196x1600xf32>
    %cst_57 = arith.constant dense<0.000000e+00> : vector<8x1600xf32>
    %123 = tpu.matmul %120, %122, %cst_57 {dimension_numbers = #tpu.dot_dimension_numbers<[1], [0], [0], [1], [0, 0, 1, 1], [], []>} : vector<8x196xf32>, vector<196x1600xf32>, vector<8x1600xf32> -> vector<8x1600xf32>
    %124 = arith.addf %111, %123 : vector<8x1600xf32>
    %125 = vector.extract_strided_slice %9 {offsets = [5, 0], sizes = [1, 196], strides = [1, 1]} : vector<6x196xf32> to vector<1x196xf32>
    %126 = vector.extract_strided_slice %16 {offsets = [5, 0], sizes = [1, 196], strides = [1, 1]} : vector<6x196xf32> to vector<1x196xf32>
    %127 = vector.extract_strided_slice %23 {offsets = [5, 0], sizes = [1, 196], strides = [1, 1]} : vector<6x196xf32> to vector<1x196xf32>
    %128 = vector.extract_strided_slice %30 {offsets = [5, 0], sizes = [1, 196], strides = [1, 1]} : vector<6x196xf32> to vector<1x196xf32>
    %129 = vector.extract_strided_slice %37 {offsets = [5, 0], sizes = [1, 196], strides = [1, 1]} : vector<6x196xf32> to vector<1x196xf32>
    %130 = vector.extract_strided_slice %44 {offsets = [5, 0], sizes = [1, 196], strides = [1, 1]} : vector<6x196xf32> to vector<1x196xf32>
    %131 = vector.extract_strided_slice %51 {offsets = [5, 0], sizes = [1, 196], strides = [1, 1]} : vector<6x196xf32> to vector<1x196xf32>
    %132 = vector.extract_strided_slice %58 {offsets = [5, 0], sizes = [1, 196], strides = [1, 1]} : vector<6x196xf32> to vector<1x196xf32>
    %133 = tpu.concatenate %125, %126, %127, %128, %129, %130, %131, %132 in 0 : vector<1x196xf32>, vector<1x196xf32>, vector<1x196xf32>, vector<1x196xf32>, vector<1x196xf32>, vector<1x196xf32>, vector<1x196xf32>, vector<1x196xf32> -> vector<8x196xf32>
    %c5_58 = arith.constant 5 : index
    %c0_59 = arith.constant 0 : index
    %c0_60 = arith.constant 0 : index
    %134 = vector.load %arg5[%c5_58, %c0_59, %c0_60] : memref<6x196x1600xf32, #tpu.memory_space<vmem>>, vector<1x196x1600xf32>
    %135 = vector.shape_cast %134 : vector<1x196x1600xf32> to vector<196x1600xf32>
    %cst_61 = arith.constant dense<0.000000e+00> : vector<8x1600xf32>
    %136 = tpu.matmul %133, %135, %cst_61 {dimension_numbers = #tpu.dot_dimension_numbers<[1], [0], [0], [1], [0, 0, 1, 1], [], []>} : vector<8x196xf32>, vector<196x1600xf32>, vector<8x1600xf32> -> vector<8x1600xf32>
    %137 = arith.addf %124, %136 : vector<8x1600xf32>
    %c0_62 = arith.constant 0 : index
    %c0_63 = arith.constant 0 : index
    %138 = vector.load %arg6[%c0_62, %c0_63] : memref<1x1600xf32, #tpu.memory_space<vmem>>, vector<1x1600xf32>
    %139 = vector.broadcast %138 : vector<1x1600xf32> to vector<8x1600xf32>
    %140 = arith.addf %137, %139 : vector<8x1600xf32>
    %141 = math.tanh %140 : vector<8x1600xf32>
    %c0_64 = arith.constant 0 : index
    %c0_65 = arith.constant 0 : index
    %142 = vector.load %arg7[%c0_64, %c0_65] : memref<1600x128xf32, #tpu.memory_space<vmem>>, vector<1600x128xf32>
    %cst_66 = arith.constant dense<0.000000e+00> : vector<8x128xf32>
    %143 = tpu.matmul %141, %142, %cst_66 {dimension_numbers = #tpu.dot_dimension_numbers<[1], [0], [0], [1], [0, 0, 1, 1], [], []>} : vector<8x1600xf32>, vector<1600x128xf32>, vector<8x128xf32> -> vector<8x128xf32>
    %c0_67 = arith.constant 0 : index
    %c0_68 = arith.constant 0 : index
    %144 = vector.load %arg8[%c0_67, %c0_68] : memref<1x128xf32, #tpu.memory_space<vmem>>, vector<1x128xf32>
    %145 = vector.broadcast %144 : vector<1x128xf32> to vector<8x128xf32>
    %146 = arith.addf %143, %145 : vector<8x128xf32>
    %cst_69 = arith.constant 0.000000e+00 : f32
    %147 = vector.broadcast %cst_69 : f32 to vector<8x128xf32>
    %148 = arith.maximumf %146, %147 : vector<8x128xf32>
    %c0_70 = arith.constant 0 : index
    %c0_71 = arith.constant 0 : index
    %149 = vector.load %arg9[%c0_70, %c0_71] : memref<128x128xf32, #tpu.memory_space<vmem>>, vector<128x128xf32>
    %cst_72 = arith.constant dense<0.000000e+00> : vector<8x128xf32>
    %150 = tpu.matmul %148, %149, %cst_72 {dimension_numbers = #tpu.dot_dimension_numbers<[1], [0], [0], [1], [0, 0, 1, 1], [], []>} : vector<8x128xf32>, vector<128x128xf32>, vector<8x128xf32> -> vector<8x128xf32>
    %c0_73 = arith.constant 0 : index
    %c0_74 = arith.constant 0 : index
    %151 = vector.load %arg10[%c0_73, %c0_74] : memref<1x128xf32, #tpu.memory_space<vmem>>, vector<1x128xf32>
    %152 = vector.broadcast %151 : vector<1x128xf32> to vector<8x128xf32>
    %153 = arith.addf %150, %152 : vector<8x128xf32>
    %cst_75 = arith.constant 0.000000e+00 : f32
    %154 = vector.broadcast %cst_75 : f32 to vector<8x128xf32>
    %155 = arith.maximumf %153, %154 : vector<8x128xf32>
    %c0_76 = arith.constant 0 : index
    %c0_77 = arith.constant 0 : index
    %156 = vector.load %arg11[%c0_76, %c0_77] : memref<128x128xf32, #tpu.memory_space<vmem>>, vector<128x128xf32>
    %cst_78 = arith.constant dense<0.000000e+00> : vector<8x128xf32>
    %157 = tpu.matmul %155, %156, %cst_78 {dimension_numbers = #tpu.dot_dimension_numbers<[1], [0], [0], [1], [0, 0, 1, 1], [], []>} : vector<8x128xf32>, vector<128x128xf32>, vector<8x128xf32> -> vector<8x128xf32>
    %c0_79 = arith.constant 0 : index
    %c0_80 = arith.constant 0 : index
    %158 = vector.load %arg12[%c0_79, %c0_80] : memref<1x128xf32, #tpu.memory_space<vmem>>, vector<1x128xf32>
    %159 = vector.broadcast %158 : vector<1x128xf32> to vector<8x128xf32>
    %160 = arith.addf %157, %159 : vector<8x128xf32>
    %c0_81 = arith.constant 0 : index
    %c0_82 = arith.constant 0 : index
    %161 = vector.load %arg13[%c0_81, %c0_82] : memref<8x128xf32, #tpu.memory_space<vmem>>, vector<8x128xf32>
    tpu.vector_store %arg13[%c0_81, %c0_82], %160 {strides = array<i32>} : memref<8x128xf32, #tpu.memory_space<vmem>>, vector<8x128xf32>,
    return
  }
  func.func @transform_0(%arg0: i32) -> (i32, i32, i32) {
    %c0_i32 = arith.constant 0 : i32
    %c0_i32_0 = arith.constant 0 : i32
    %c0_i32_1 = arith.constant 0 : i32
    return %arg0, %c0_i32, %c0_i32_0 : i32, i32, i32
  }
  func.func @transform_1(%arg0: i32) -> (i32, i32) {
    %c0_i32 = arith.constant 0 : i32
    %c0_i32_0 = arith.constant 0 : i32
    %c0_i32_1 = arith.constant 0 : i32
    return %c0_i32, %c0_i32_0 : i32, i32
  }
  func.func @transform_2(%arg0: i32) -> (i32, i32) {
    %c0_i32 = arith.constant 0 : i32
    %c0_i32_0 = arith.constant 0 : i32
    %c0_i32_1 = arith.constant 0 : i32
    return %c0_i32, %c0_i32_0 : i32, i32
  }
  func.func @transform_3(%arg0: i32) -> (i32, i32) {
    %c0_i32 = arith.constant 0 : i32
    %c0_i32_0 = arith.constant 0 : i32
    %c0_i32_1 = arith.constant 0 : i32
    return %c0_i32, %c0_i32_0 : i32, i32
  }
  func.func @transform_4(%arg0: i32) -> (i32, i32, i32) {
    %c0_i32 = arith.constant 0 : i32
    %c0_i32_0 = arith.constant 0 : i32
    %c0_i32_1 = arith.constant 0 : i32
    %c0_i32_2 = arith.constant 0 : i32
    return %c0_i32, %c0_i32_0, %c0_i32_1 : i32, i32, i32
  }
  func.func @transform_5(%arg0: i32) -> (i32, i32) {
    %c0_i32 = arith.constant 0 : i32
    %c0_i32_0 = arith.constant 0 : i32
    %c0_i32_1 = arith.constant 0 : i32
    return %c0_i32, %c0_i32_0 : i32, i32
  }
  func.func @transform_6(%arg0: i32) -> (i32, i32) {
    %c0_i32 = arith.constant 0 : i32
    %c0_i32_0 = arith.constant 0 : i32
    %c0_i32_1 = arith.constant 0 : i32
    return %c0_i32, %c0_i32_0 : i32, i32
  }
  func.func @transform_7(%arg0: i32) -> (i32, i32) {
    %c0_i32 = arith.constant 0 : i32
    %c0_i32_0 = arith.constant 0 : i32
    %c0_i32_1 = arith.constant 0 : i32
    return %c0_i32, %c0_i32_0 : i32, i32
  }
  func.func @transform_8(%arg0: i32) -> (i32, i32) {
    %c0_i32 = arith.constant 0 : i32
    %c0_i32_0 = arith.constant 0 : i32
    %c0_i32_1 = arith.constant 0 : i32
    return %c0_i32, %c0_i32_0 : i32, i32
  }
  func.func @transform_9(%arg0: i32) -> (i32, i32) {
    %c0_i32 = arith.constant 0 : i32
    %c0_i32_0 = arith.constant 0 : i32
    %c0_i32_1 = arith.constant 0 : i32
    return %c0_i32, %c0_i32_0 : i32, i32
  }
  func.func @transform_10(%arg0: i32) -> (i32, i32) {
    %c0_i32 = arith.constant 0 : i32
    %c0_i32_0 = arith.constant 0 : i32
    %c0_i32_1 = arith.constant 0 : i32
    return %c0_i32, %c0_i32_0 : i32, i32
  }
  func.func @transform_11(%arg0: i32) -> (i32, i32) {
    %c0_i32 = arith.constant 0 : i32
    %c0_i32_0 = arith.constant 0 : i32
    %c0_i32_1 = arith.constant 0 : i32
    return %c0_i32, %c0_i32_0 : i32, i32
  }
  func.func @transform_12(%arg0: i32) -> (i32, i32) {
    %c0_i32 = arith.constant 0 : i32
    %c0_i32_0 = arith.constant 0 : i32
    return %arg0, %c0_i32 : i32, i32
  }
}

</mosaic_0001>

<llo_original>
// kernel: _lenet5_forward.1
$region0: #{_lenet5_forward.1}
  #allocation0 [shape = 'u32[]', space=smem, size = 0x4, offset = 0x4, fixed_abs, tag = 'smem constant byte address 0x4 - core index']
  #allocation1 [shape = 'u32[144,128]{1,0:T(1,128)}', space=vmem, size = 0x12000, scoped, tag = 'internal scratch']
  %s0 = inlined_call_operand.vmem [shape: f32[8,75,784], index: 0, kind: input, shape index: {}]
  %s1 = inlined_call_operand.vmem [shape: f32[6,75], index: 1, kind: input, shape index: {}]
  %s2 = inlined_call_operand.vmem [shape: f32[6,1], index: 2, kind: input, shape index: {}]
  %s3 = inlined_call_operand.vmem [shape: f32[784,196], index: 3, kind: input, shape index: {}]
  %s4 = inlined_call_operand.vmem [shape: f32[6,196,1600], index: 4, kind: input, shape index: {}]
  %s5 = inlined_call_operand.vmem [shape: f32[1,1600], index: 5, kind: input, shape index: {}]
  %s6 = inlined_call_operand.vmem [shape: f32[1600,128], index: 6, kind: input, shape index: {}]
  %s7 = inlined_call_operand.vmem [shape: f32[1,128], index: 7, kind: input, shape index: {}]
  %s8 = inlined_call_operand.vmem [shape: f32[128,128], index: 8, kind: input, shape index: {}]
  %s9 = inlined_call_operand.vmem [shape: f32[1,128], index: 9, kind: input, shape index: {}]
  %s10 = inlined_call_operand.vmem [shape: f32[128,128], index: 10, kind: input, shape index: {}]
  %s11 = inlined_call_operand.vmem [shape: f32[1,128], index: 11, kind: input, shape index: {}]
  %s12 = inlined_call_operand.vmem [shape: f32[8,128], index: 12, kind: output, shape index: {}]
  %s13 = sld [smem:[#allocation0]]
  $region58: #{_lenet5_forward.1} parent=0
    _
  %s15 = ssub.s32 1, %s13
  %s16 = scalar_select 0, %s15, %s13
  // Predicated region
  $region2: #{_lenet5_forward.1} parent=0 // pred_check
    _
  $region3: #{_lenet5_forward.1} parent=0 // pred_check_branch
    %18 = sbr.rel (0) target = $region5
  $region4: #{_lenet5_forward.1} parent=0 // pred_region
    _
  $region5: #{_lenet5_forward.1} parent=0 // pred_fallthru
    _
  // Predicated region
  $region6: #{_lenet5_forward.1} parent=0 // pred_check
    _
  $region7: #{_lenet5_forward.1} parent=0 // pred_check_branch
    %20 = sbr.rel (0) target = $region9
  $region8: #{_lenet5_forward.1} parent=0 // pred_region
    _
  $region9: #{_lenet5_forward.1} parent=0 // pred_fallthru
    _
  // Predicated region
  $region10: #{_lenet5_forward.1} parent=0 // pred_check
    _
  $region11: #{_lenet5_forward.1} parent=0 // pred_check_branch
    %22 = sbr.rel (0) target = $region13
  $region12: #{_lenet5_forward.1} parent=0 // pred_region
    _
  $region13: #{_lenet5_forward.1} parent=0 // pred_fallthru
    _
  // Predicated region
  $region14: #{_lenet5_forward.1} parent=0 // pred_check
    _
  $region15: #{_lenet5_forward.1} parent=0 // pred_check_branch
    %24 = sbr.rel (0) target = $region17
  $region16: #{_lenet5_forward.1} parent=0 // pred_region
    _
  $region17: #{_lenet5_forward.1} parent=0 // pred_fallthru
    _
  // Predicated region
  $region18: #{_lenet5_forward.1} parent=0 // pred_check
    _
  $region19: #{_lenet5_forward.1} parent=0 // pred_check_branch
    %26 = sbr.rel (0) target = $region21
  $region20: #{_lenet5_forward.1} parent=0 // pred_region
    _
  $region21: #{_lenet5_forward.1} parent=0 // pred_fallthru
    _
  // Predicated region
  $region22: #{_lenet5_forward.1} parent=0 // pred_check
    _
  $region23: #{_lenet5_forward.1} parent=0 // pred_check_branch
    %28 = sbr.rel (0) target = $region25
  $region24: #{_lenet5_forward.1} parent=0 // pred_region
    _
  $region25: #{_lenet5_forward.1} parent=0 // pred_fallthru
    _
  // Predicated region
  $region26: #{_lenet5_forward.1} parent=0 // pred_check
    _
  $region27: #{_lenet5_forward.1} parent=0 // pred_check_branch
    %30 = sbr.rel (0) target = $region29
  $region28: #{_lenet5_forward.1} parent=0 // pred_region
    _
  $region29: #{_lenet5_forward.1} parent=0 // pred_fallthru
    _
  // Predicated region
  $region30: #{_lenet5_forward.1} parent=0 // pred_check
    _
  $region31: #{_lenet5_forward.1} parent=0 // pred_check_branch
    %32 = sbr.rel (0) target = $region33
  $region32: #{_lenet5_forward.1} parent=0 // pred_region
    _
  $region33: #{_lenet5_forward.1} parent=0 // pred_fallthru
    _
  // Predicated region
  $region34: #{_lenet5_forward.1} parent=0 // pred_check
    _
  $region35: #{_lenet5_forward.1} parent=0 // pred_check_branch
    %34 = sbr.rel (0) target = $region37
  $region36: #{_lenet5_forward.1} parent=0 // pred_region
    _
  $region37: #{_lenet5_forward.1} parent=0 // pred_fallthru
    _
  // Predicated region
  $region38: #{_lenet5_forward.1} parent=0 // pred_check
    _
  $region39: #{_lenet5_forward.1} parent=0 // pred_check_branch
    %36 = sbr.rel (0) target = $region41
  $region40: #{_lenet5_forward.1} parent=0 // pred_region
    _
  $region41: #{_lenet5_forward.1} parent=0 // pred_fallthru
    _
  // Predicated region
  $region42: #{_lenet5_forward.1} parent=0 // pred_check
    _
  $region43: #{_lenet5_forward.1} parent=0 // pred_check_branch
    %38 = sbr.rel (0) target = $region45
  $region44: #{_lenet5_forward.1} parent=0 // pred_region
    _
  $region45: #{_lenet5_forward.1} parent=0 // pred_fallthru
    _
  // Predicated region
  $region46: #{_lenet5_forward.1} parent=0 // pred_check
    _
  $region47: #{_lenet5_forward.1} parent=0 // pred_check_branch
    %40 = sbr.rel (0) target = $region49
  $region48: #{_lenet5_forward.1} parent=0 // pred_region
    _
  $region49: #{_lenet5_forward.1} parent=0 // pred_fallthru
    _
  %v41 = vld [vmem:[%s1] sm:$0x3f]
  %v42 = vld [vmem:[%s2] sm:$0x3f]
  %v43 = vld [vmem:[%s3] sm:$0xff]
  %v44 = vld [vmem:[%s3 + $0x8] sm:$0xff]
  %v45 = vld [vmem:[%s3 + $0x10] sm:$0xff]
  %v46 = vld [vmem:[%s3 + $0x18] sm:$0xff]
  %v47 = vld [vmem:[%s3 + $0x20] sm:$0xff]
  %v48 = vld [vmem:[%s3 + $0x28] sm:$0xff]
  %v49 = vld [vmem:[%s3 + $0x30] sm:$0xff]
  %v50 = vld [vmem:[%s3 + $0x38] sm:$0xff]
  %v51 = vld [vmem:[%s3 + $0x40] sm:$0xff]
  %v52 = vld [vmem:[%s3 + $0x48] sm:$0xff]
  %v53 = vld [vmem:[%s3 + $0x50] sm:$0xff]
  %v54 = vld [vmem:[%s3 + $0x58] sm:$0xff]
  %v55 = vld [vmem:[%s3 + $0x60] sm:$0xff]
  %v56 = vld [vmem:[%s3 + $0x68] sm:$0xff]
  %v57 = vld [vmem:[%s3 + $0x70] sm:$0xff]
  %v58 = vld [vmem:[%s3 + $0x78] sm:$0xff]
  %v59 = vld [vmem:[%s3 + $0x80] sm:$0xff]
  %v60 = vld [vmem:[%s3 + $0x88] sm:$0xff]
  %v61 = vld [vmem:[%s3 + $0x90] sm:$0xff]
  %v62 = vld [vmem:[%s3 + $0x98] sm:$0xff]
  %v63 = vld [vmem:[%s3 + $0xa0] sm:$0xff]
  %v64 = vld [vmem:[%s3 + $0xa8] sm:$0xff]
  %v65 = vld [vmem:[%s3 + $0xb0] sm:$0xff]
  %v66 = vld [vmem:[%s3 + $0xb8] sm:$0xff]
  %v67 = vld [vmem:[%s3 + $0xc0] sm:$0xff]
  %v68 = vld [vmem:[%s3 + $0xc8] sm:$0xff]
  %v69 = vld [vmem:[%s3 + $0xd0] sm:$0xff]
  %v70 = vld [vmem:[%s3 + $0xd8] sm:$0xff]
  %v71 = vld [vmem:[%s3 + $0xe0] sm:$0xff]
  %v72 = vld [vmem:[%s3 + $0xe8] sm:$0xff]
  %v73 = vld [vmem:[%s3 + $0xf0] sm:$0xff]
  %v74 = vld [vmem:[%s3 + $0xf8] sm:$0xff]
  %v75 = vld [vmem:[%s3 + $0x100] sm:$0xff]
  %v76 = vld [vmem:[%s3 + $0x108] sm:$0xff]
  %v77 = vld [vmem:[%s3 + $0x110] sm:$0xff]
  %v78 = vld [vmem:[%s3 + $0x118] sm:$0xff]
  %v79 = vld [vmem:[%s3 + $0x120] sm:$0xff]
  %v80 = vld [vmem:[%s3 + $0x128] sm:$0xff]
  %v81 = vld [vmem:[%s3 + $0x130] sm:$0xff]
  %v82 = vld [vmem:[%s3 + $0x138] sm:$0xff]
  %v83 = vld [vmem:[%s3 + $0x140] sm:$0xff]
  %v84 = vld [vmem:[%s3 + $0x148] sm:$0xff]
  %v85 = vld [vmem:[%s3 + $0x150] sm:$0xff]
  %v86 = vld [vmem:[%s3 + $0x158] sm:$0xff]
  %v87 = vld [vmem:[%s3 + $0x160] sm:$0xff]
  %v88 = vld [vmem:[%s3 + $0x168] sm:$0xff]
  %v89 = vld [vmem:[%s3 + $0x170] sm:$0xff]
  %v90 = vld [vmem:[%s3 + $0x178] sm:$0xff]
  %v91 = vld [vmem:[%s3 + $0x180] sm:$0xff]
  %v92 = vld [vmem:[%s3 + $0x188] sm:$0xff]
  %v93 = vld [vmem:[%s3 + $0x190] sm:$0xff]
  %v94 = vld [vmem:[%s3 + $0x198] sm:$0xff]
  %v95 = vld [vmem:[%s3 + $0x1a0] sm:$0xff]
  %v96 = vld [vmem:[%s3 + $0x1a8] sm:$0xff]
  %v97 = vld [vmem:[%s3 + $0x1b0] sm:$0xff]
  %v98 = vld [vmem:[%s3 + $0x1b8] sm:$0xff]
  %v99 = vld [vmem:[%s3 + $0x1c0] sm:$0xff]
  %v100 = vld [vmem:[%s3 + $0x1c8] sm:$0xff]
  %v101 = vld [vmem:[%s3 + $0x1d0] sm:$0xff]
  %v102 = vld [vmem:[%s3 + $0x1d8] sm:$0xff]
  %v103 = vld [vmem:[%s3 + $0x1e0] sm:$0xff]
  %v104 = vld [vmem:[%s3 + $0x1e8] sm:$0xff]
  %v105 = vld [vmem:[%s3 + $0x1f0] sm:$0xff]
  %v106 = vld [vmem:[%s3 + $0x1f8] sm:$0xff]
  %v107 = vld [vmem:[%s3 + $0x200] sm:$0xff]
  %v108 = vld [vmem:[%s3 + $0x208] sm:$0xff]
  %v109 = vld [vmem:[%s3 + $0x210] sm:$0xff]
  %v110 = vld [vmem:[%s3 + $0x218] sm:$0xff]
  %v111 = vld [vmem:[%s3 + $0x220] sm:$0xff]
  %v112 = vld [vmem:[%s3 + $0x228] sm:$0xff]
  %v113 = vld [vmem:[%s3 + $0x230] sm:$0xff]
  %v114 = vld [vmem:[%s3 + $0x238] sm:$0xff]
  %v115 = vld [vmem:[%s3 + $0x240] sm:$0xff]
  %v116 = vld [vmem:[%s3 + $0x248] sm:$0xff]
  %v117 = vld [vmem:[%s3 + $0x250] sm:$0xff]
  %v118 = vld [vmem:[%s3 + $0x258] sm:$0xff]
  %v119 = vld [vmem:[%s3 + $0x260] sm:$0xff]
  %v120 = vld [vmem:[%s3 + $0x268] sm:$0xff]
  %v121 = vld [vmem:[%s3 + $0x270] sm:$0xff]
  %v122 = vld [vmem:[%s3 + $0x278] sm:$0xff]
  %v123 = vld [vmem:[%s3 + $0x280] sm:$0xff]
  %v124 = vld [vmem:[%s3 + $0x288] sm:$0xff]
  %v125 = vld [vmem:[%s3 + $0x290] sm:$0xff]
  %v126 = vld [vmem:[%s3 + $0x298] sm:$0xff]
  %v127 = vld [vmem:[%s3 + $0x2a0] sm:$0xff]
  %v128 = vld [vmem:[%s3 + $0x2a8] sm:$0xff]
  %v129 = vld [vmem:[%s3 + $0x2b0] sm:$0xff]
  %v130 = vld [vmem:[%s3 + $0x2b8] sm:$0xff]
  %v131 = vld [vmem:[%s3 + $0x2c0] sm:$0xff]
  %v132 = vld [vmem:[%s3 + $0x2c8] sm:$0xff]
  %v133 = vld [vmem:[%s3 + $0x2d0] sm:$0xff]
  %v134 = vld [vmem:[%s3 + $0x2d8] sm:$0xff]
  %v135 = vld [vmem:[%s3 + $0x2e0] sm:$0xff]
  %v136 = vld [vmem:[%s3 + $0x2e8] sm:$0xff]
  %v137 = vld [vmem:[%s3 + $0x2f0] sm:$0xff]
  %v138 = vld [vmem:[%s3 + $0x2f8] sm:$0xff]
  %v139 = vld [vmem:[%s3 + $0x300] sm:$0xff]
  %v140 = vld [vmem:[%s3 + $0x308] sm:$0xff]
  %v141 = vld [vmem:[%s3 + $0x310] sm:$0xff]
  %v142 = vld [vmem:[%s3 + $0x318] sm:$0xff]
  %v143 = vld [vmem:[%s3 + $0x320] sm:$0xff]
  %v144 = vld [vmem:[%s3 + $0x328] sm:$0xff]
  %v145 = vld [vmem:[%s3 + $0x330] sm:$0xff]
  %v146 = vld [vmem:[%s3 + $0x338] sm:$0xff]
  %v147 = vld [vmem:[%s3 + $0x340] sm:$0xff]
  %v148 = vld [vmem:[%s3 + $0x348] sm:$0xff]
  %v149 = vld [vmem:[%s3 + $0x350] sm:$0xff]
  %v150 = vld [vmem:[%s3 + $0x358] sm:$0xff]
  %v151 = vld [vmem:[%s3 + $0x360] sm:$0xff]
  %v152 = vld [vmem:[%s3 + $0x368] sm:$0xff]
  %v153 = vld [vmem:[%s3 + $0x370] sm:$0xff]
  %v154 = vld [vmem:[%s3 + $0x378] sm:$0xff]
  %v155 = vld [vmem:[%s3 + $0x380] sm:$0xff]
  %v156 = vld [vmem:[%s3 + $0x388] sm:$0xff]
  %v157 = vld [vmem:[%s3 + $0x390] sm:$0xff]
  %v158 = vld [vmem:[%s3 + $0x398] sm:$0xff]
  %v159 = vld [vmem:[%s3 + $0x3a0] sm:$0xff]
  %v160 = vld [vmem:[%s3 + $0x3a8] sm:$0xff]
  %v161 = vld [vmem:[%s3 + $0x3b0] sm:$0xff]
  %v162 = vld [vmem:[%s3 + $0x3b8] sm:$0xff]
  %v163 = vld [vmem:[%s3 + $0x3c0] sm:$0xff]
  %v164 = vld [vmem:[%s3 + $0x3c8] sm:$0xff]
  %v165 = vld [vmem:[%s3 + $0x3d0] sm:$0xff]
  %v166 = vld [vmem:[%s3 + $0x3d8] sm:$0xff]
  %v167 = vld [vmem:[%s3 + $0x3e0] sm:$0xff]
  %v168 = vld [vmem:[%s3 + $0x3e8] sm:$0xff]
  %v169 = vld [vmem:[%s3 + $0x3f0] sm:$0xff]
  %v170 = vld [vmem:[%s3 + $0x3f8] sm:$0xff]
  %v171 = vld [vmem:[%s3 + $0x400] sm:$0xff]
  %v172 = vld [vmem:[%s3 + $0x408] sm:$0xff]
  %v173 = vld [vmem:[%s3 + $0x410] sm:$0xff]
  %v174 = vld [vmem:[%s3 + $0x418] sm:$0xff]
  %v175 = vld [vmem:[%s3 + $0x420] sm:$0xff]
  %v176 = vld [vmem:[%s3 + $0x428] sm:$0xff]
  %v177 = vld [vmem:[%s3 + $0x430] sm:$0xff]
  %v178 = vld [vmem:[%s3 + $0x438] sm:$0xff]
  %v179 = vld [vmem:[%s3 + $0x440] sm:$0xff]
  %v180 = vld [vmem:[%s3 + $0x448] sm:$0xff]
  %v181 = vld [vmem:[%s3 + $0x450] sm:$0xff]
  %v182 = vld [vmem:[%s3 + $0x458] sm:$0xff]
  %v183 = vld [vmem:[%s3 + $0x460] sm:$0xff]
  %v184 = vld [vmem:[%s3 + $0x468] sm:$0xff]
  %v185 = vld [vmem:[%s3 + $0x470] sm:$0xff]
  %v186 = vld [vmem:[%s3 + $0x478] sm:$0xff]
  %v187 = vld [vmem:[%s3 + $0x480] sm:$0xff]
  %v188 = vld [vmem:[%s3 + $0x488] sm:$0xff]
  %v189 = vld [vmem:[%s3 + $0x490] sm:$0xff]
  %v190 = vld [vmem:[%s3 + $0x498] sm:$0xff]
  %v191 = vld [vmem:[%s3 + $0x4a0] sm:$0xff]
  %v192 = vld [vmem:[%s3 + $0x4a8] sm:$0xff]
  %v193 = vld [vmem:[%s3 + $0x4b0] sm:$0xff]
  %v194 = vld [vmem:[%s3 + $0x4b8] sm:$0xff]
  %v195 = vld [vmem:[%s3 + $0x4c0] sm:$0xff]
  %v196 = vld [vmem:[%s3 + $0x4c8] sm:$0xff]
  %v197 = vld [vmem:[%s3 + $0x4d0] sm:$0xff]
  %v198 = vld [vmem:[%s3 + $0x4d8] sm:$0xff]
  %v199 = vld [vmem:[%s3 + $0x4e0] sm:$0xff]
  %v200 = vld [vmem:[%s3 + $0x4e8] sm:$0xff]
  %v201 = vld [vmem:[%s3 + $0x4f0] sm:$0xff]
  %v202 = vld [vmem:[%s3 + $0x4f8] sm:$0xff]
  %v203 = vld [vmem:[%s3 + $0x500] sm:$0xff]
  %v204 = vld [vmem:[%s3 + $0x508] sm:$0xff]
  %v205 = vld [vmem:[%s3 + $0x510] sm:$0xff]
  %v206 = vld [vmem:[%s3 + $0x518] sm:$0xff]
  %v207 = vld [vmem:[%s3 + $0x520] sm:$0xff]
  %v208 = vld [vmem:[%s3 + $0x528] sm:$0xff]
  %v209 = vld [vmem:[%s3 + $0x530] sm:$0xff]
  %v210 = vld [vmem:[%s3 + $0x538] sm:$0xff]
  %v211 = vld [vmem:[%s3 + $0x540] sm:$0xff]
  %v212 = vld [vmem:[%s3 + $0x548] sm:$0xff]
  %v213 = vld [vmem:[%s3 + $0x550] sm:$0xff]
  %v214 = vld [vmem:[%s3 + $0x558] sm:$0xff]
  %v215 = vld [vmem:[%s3 + $0x560] sm:$0xff]
  %v216 = vld [vmem:[%s3 + $0x568] sm:$0xff]
  %v217 = vld [vmem:[%s3 + $0x570] sm:$0xff]
  %v218 = vld [vmem:[%s3 + $0x578] sm:$0xff]
  %v219 = vld [vmem:[%s3 + $0x580] sm:$0xff]
  %v220 = vld [vmem:[%s3 + $0x588] sm:$0xff]
  %v221 = vld [vmem:[%s3 + $0x590] sm:$0xff]
  %v222 = vld [vmem:[%s3 + $0x598] sm:$0xff]
  %v223 = vld [vmem:[%s3 + $0x5a0] sm:$0xff]
  %v224 = vld [vmem:[%s3 + $0x5a8] sm:$0xff]
  %v225 = vld [vmem:[%s3 + $0x5b0] sm:$0xff]
  %v226 = vld [vmem:[%s3 + $0x5b8] sm:$0xff]
  %v227 = vld [vmem:[%s3 + $0x5c0] sm:$0xff]
  %v228 = vld [vmem:[%s3 + $0x5c8] sm:$0xff]
  %v229 = vld [vmem:[%s3 + $0x5d0] sm:$0xff]
  %v230 = vld [vmem:[%s3 + $0x5d8] sm:$0xff]
  %v231 = vld [vmem:[%s3 + $0x5e0] sm:$0xff]
  %v232 = vld [vmem:[%s3 + $0x5e8] sm:$0xff]
  %v233 = vld [vmem:[%s3 + $0x5f0] sm:$0xff]
  %v234 = vld [vmem:[%s3 + $0x5f8] sm:$0xff]
  %v235 = vld [vmem:[%s3 + $0x600] sm:$0xff]
  %v236 = vld [vmem:[%s3 + $0x608] sm:$0xff]
  %v237 = vld [vmem:[%s3 + $0x610] sm:$0xff]
  %v238 = vld [vmem:[%s3 + $0x618] sm:$0xff]
  %v239 = vld [vmem:[%s0] sm:$0xff]
  %v240 = vld [vmem:[%s0 + $0x8] sm:$0xff]
  %v241 = vld [vmem:[%s0 + $0x10] sm:$0xff]
  %v242 = vld [vmem:[%s0 + $0x18] sm:$0xff]
  %v243 = vld [vmem:[%s0 + $0x20] sm:$0xff]
  %v244 = vld [vmem:[%s0 + $0x28] sm:$0xff]
  %v245 = vld [vmem:[%s0 + $0x30] sm:$0xff]
  %v246 = vld [vmem:[%s0 + $0x38] sm:$0xff]
  %v247 = vld [vmem:[%s0 + $0x40] sm:$0xff]
  %v248 = vld [vmem:[%s0 + $0x48] sm:$0xff]
  %v249 = vld [vmem:[%s0 + $0x50] sm:$0xff]
  %v250 = vld [vmem:[%s0 + $0x58] sm:$0xff]
  %v251 = vld [vmem:[%s0 + $0x60] sm:$0xff]
  %v252 = vld [vmem:[%s0 + $0x68] sm:$0xff]
  %v253 = vld [vmem:[%s0 + $0x70] sm:$0xff]
  %v254 = vld [vmem:[%s0 + $0x78] sm:$0xff]
  %v255 = vld [vmem:[%s0 + $0x80] sm:$0xff]
  %v256 = vld [vmem:[%s0 + $0x88] sm:$0xff]
  %v257 = vld [vmem:[%s0 + $0x90] sm:$0xff]
  %v258 = vld [vmem:[%s0 + $0x98] sm:$0xff]
  %v259 = vld [vmem:[%s0 + $0xa0] sm:$0xff]
  %v260 = vld [vmem:[%s0 + $0xa8] sm:$0xff]
  %v261 = vld [vmem:[%s0 + $0xb0] sm:$0xff]
  %v262 = vld [vmem:[%s0 + $0xb8] sm:$0xff]
  %v263 = vld [vmem:[%s0 + $0xc0] sm:$0xff]
  %v264 = vld [vmem:[%s0 + $0xc8] sm:$0xff]
  %v265 = vld [vmem:[%s0 + $0xd0] sm:$0xff]
  %v266 = vld [vmem:[%s0 + $0xd8] sm:$0xff]
  %v267 = vld [vmem:[%s0 + $0xe0] sm:$0xff]
  %v268 = vld [vmem:[%s0 + $0xe8] sm:$0xff]
  %v269 = vld [vmem:[%s0 + $0xf0] sm:$0xff]
  %v270 = vld [vmem:[%s0 + $0xf8] sm:$0xff]
  %v271 = vld [vmem:[%s0 + $0x100] sm:$0xff]
  %v272 = vld [vmem:[%s0 + $0x108] sm:$0xff]
  %v273 = vld [vmem:[%s0 + $0x110] sm:$0xff]
  %v274 = vld [vmem:[%s0 + $0x118] sm:$0xff]
  %v275 = vld [vmem:[%s0 + $0x120] sm:$0xff]
  %v276 = vld [vmem:[%s0 + $0x128] sm:$0xff]
  %v277 = vld [vmem:[%s0 + $0x130] sm:$0xff]
  %v278 = vld [vmem:[%s0 + $0x138] sm:$0xff]
  %v279 = vld [vmem:[%s0 + $0x140] sm:$0xff]
  %v280 = vld [vmem:[%s0 + $0x148] sm:$0xff]
  %v281 = vld [vmem:[%s0 + $0x150] sm:$0xff]
  %v282 = vld [vmem:[%s0 + $0x158] sm:$0xff]
  %v283 = vld [vmem:[%s0 + $0x160] sm:$0xff]
  %v284 = vld [vmem:[%s0 + $0x168] sm:$0xff]
  %v285 = vld [vmem:[%s0 + $0x170] sm:$0xff]
  %v286 = vld [vmem:[%s0 + $0x178] sm:$0xff]
  %v287 = vld [vmem:[%s0 + $0x180] sm:$0xff]
  %v288 = vld [vmem:[%s0 + $0x188] sm:$0xff]
  %v289 = vld [vmem:[%s0 + $0x190] sm:$0xff]
  %v290 = vld [vmem:[%s0 + $0x198] sm:$0xff]
  %v291 = vld [vmem:[%s0 + $0x1a0] sm:$0xff]
  %v292 = vld [vmem:[%s0 + $0x1a8] sm:$0xff]
  %v293 = vld [vmem:[%s0 + $0x1b0] sm:$0xff]
  %v294 = vld [vmem:[%s0 + $0x1b8] sm:$0xff]
  %v295 = vld [vmem:[%s0 + $0x1c0] sm:$0xff]
  %v296 = vld [vmem:[%s0 + $0x1c8] sm:$0xff]
  %v297 = vld [vmem:[%s0 + $0x1d0] sm:$0xff]
  %v298 = vld [vmem:[%s0 + $0x1d8] sm:$0xff]
  %v299 = vld [vmem:[%s0 + $0x1e0] sm:$0xff]
  %v300 = vld [vmem:[%s0 + $0x1e8] sm:$0xff]
  %v301 = vld [vmem:[%s0 + $0x1f0] sm:$0xff]
  %v302 = vld [vmem:[%s0 + $0x1f8] sm:$0x7]
  %v303 = vld [vmem:[%s0 + $0x200] sm:$0x7]
  %v304 = vld [vmem:[%s0 + $0x208] sm:$0x7]
  %v305 = vld [vmem:[%s0 + $0x210] sm:$0x7]
  %v306 = vld [vmem:[%s0 + $0x218] sm:$0x7]
  %v307 = vld [vmem:[%s0 + $0x220] sm:$0x7]
  %v308 = vld [vmem:[%s0 + $0x228] sm:$0x7]
  %310 = vset.pattern.permute.xlu0 0
  %311 = vperm.xlu0 %310, %v42
  %v312 = vpop.permute.xlu0 %311
  %vm314 = vcmask 613376
  %v316 = vsel %vm314, %v41, 0
  %vm318 = vcmask 1042432
  %v320 = vsel %vm318, %v302, 0
  %v323 = vsel %vm318, %v303, 0
  %v326 = vsel %vm318, %v304, 0
  %v329 = vsel %vm318, %v305, 0
  %v332 = vsel %vm318, %v306, 0
  %v335 = vsel %vm318, %v307, 0
  %v338 = vsel %vm318, %v308, 0
  %340 = vmatprep.subr.mxu0 0.0
  %341 = vmatpush1.msra.mxu0 0.0
  %342 = vmatprep.subr.mxu0 0.0
  %343 = vmatpush1.msra.mxu0 0.0
  %344 = vmatprep.subr.mxu0 0.0
  %345 = vmatpush1.msra.mxu0 0.0
  %346 = vmatprep.subr.mxu0 0.0
  %347 = vmatpush1.msra.mxu0 0.0
  %348 = vmatprep.subr.mxu0 0.0
  %349 = vmatpush1.msra.mxu0 0.0
  %350 = vmatprep.subr.mxu0 0.0
  %351 = vmatpush1.msra.mxu0 0.0
  %352 = vmatprep.subr.mxu0 %v323
  %353 = vmatpush1.msra.mxu0 %v320
  %354 = vmatprep.subr.mxu0 %v296
  %355 = vmatpush1.msra.mxu0 %v295
  %356 = vmatprep.subr.mxu0 %v289
  %357 = vmatpush1.msra.mxu0 %v288
  %358 = vmatprep.subr.mxu0 %v282
  %359 = vmatpush1.msra.mxu0 %v281
  %360 = vmatprep.subr.mxu0 %v275
  %361 = vmatpush1.msra.mxu0 %v274
  %362 = vmatprep.subr.mxu0 %v268
  %363 = vmatpush1.msra.mxu0 %v267
  %364 = vmatprep.subr.mxu0 %v261
  %365 = vmatpush1.msra.mxu0 %v260
  %366 = vmatprep.subr.mxu0 %v254
  %367 = vmatpush1.msra.mxu0 %v253
  %368 = vmatprep.subr.mxu0 %v247
  %369 = vmatpush1.msra.mxu0 %v246
  %370 = vmatprep.subr.mxu0 %v240
  %371 = vmatpush1.msra.mxu0 %v239
  %372 = vmatprep.subr.mxu0 0.0
  %373 = vmatpush2.msra.mxu0 0.0
  %374 = vmatprep.subr.mxu0 0.0
  %375 = vmatpush2.msra.mxu0 0.0
  %376 = vmatprep.subr.mxu0 0.0
  %377 = vmatpush2.msra.mxu0 0.0
  %378 = vmatprep.subr.mxu0 0.0
  %379 = vmatpush2.msra.mxu0 0.0
  %380 = vmatprep.subr.mxu0 0.0
  %381 = vmatpush2.msra.mxu0 0.0
  %382 = vmatprep.subr.mxu0 0.0
  %383 = vmatpush2.msra.mxu0 0.0
  %384 = vmatprep.subr.mxu0 0.0
  %385 = vmatpush2.msra.mxu0 0.0
  %386 = vmatprep.subr.mxu0 0.0
  %387 = vmatpush2.msra.mxu0 0.0
  %388 = vmatprep.subr.mxu0 0.0
  %389 = vmatpush2.msra.mxu0 0.0
  %390 = vmatprep.subr.mxu0 0.0
  %391 = vmatpush2.msra.mxu0 0.0
  %392 = vmatprep.subr.mxu0 0.0
  %393 = vmatpush2.msra.mxu0 0.0
  %394 = vmatprep.subr.mxu0 0.0
  %395 = vmatpush2.msra.mxu0 0.0
  %396 = vmatprep.subr.mxu0 0.0
  %397 = vmatpush2.msra.mxu0 0.0
  %398 = vmatprep.subr.mxu0 0.0
  %399 = vmatpush2.msra.mxu0 0.0
  %400 = vmatprep.subr.mxu0 0.0
  %401 = vmatpush2.msra.mxu0 0.0
  %402 = vmatprep.subr.mxu0 0.0
  %403 = vmatpush2.msra.mxu0 0.0
  %404 = vmatprep.mubr.f32.mxu0 0.0
  %405 = vmatmul.mubr.f32.gmra.mxu0 %v316
  %v406 = vpop.f32.mrf.mxu0
  %v407 = vadd.f32 %v312, %v406
  %v408 = vpop.f32.mrf.mxu0
  %v409 = vadd.f32 %v312, %v408
  %410 = vdwg.mxu0
  %411 = vmatprep.subr.mxu0 0.0
  %412 = vmatpush1.msra.mxu0 0.0
  %413 = vmatprep.subr.mxu0 0.0
  %414 = vmatpush1.msra.mxu0 0.0
  %415 = vmatprep.subr.mxu0 0.0
  %416 = vmatpush1.msra.mxu0 0.0
  %417 = vmatprep.subr.mxu0 0.0
  %418 = vmatpush1.msra.mxu0 0.0
  %419 = vmatprep.subr.mxu0 0.0
  %420 = vmatpush1.msra.mxu0 0.0
  %421 = vmatprep.subr.mxu0 0.0
  %422 = vmatpush1.msra.mxu0 0.0
  %423 = vmatprep.subr.mxu0 %v329
  %424 = vmatpush1.msra.mxu0 %v326
  %425 = vmatprep.subr.mxu0 %v298
  %426 = vmatpush1.msra.mxu0 %v297
  %427 = vmatprep.subr.mxu0 %v291
  %428 = vmatpush1.msra.mxu0 %v290
  %429 = vmatprep.subr.mxu0 %v284
  %430 = vmatpush1.msra.mxu0 %v283
  %431 = vmatprep.subr.mxu0 %v277
  %432 = vmatpush1.msra.mxu0 %v276
  %433 = vmatprep.subr.mxu0 %v270
  %434 = vmatpush1.msra.mxu0 %v269
  %435 = vmatprep.subr.mxu0 %v263
  %436 = vmatpush1.msra.mxu0 %v262
  %437 = vmatprep.subr.mxu0 %v256
  %438 = vmatpush1.msra.mxu0 %v255
  %439 = vmatprep.subr.mxu0 %v249
  %440 = vmatpush1.msra.mxu0 %v248
  %441 = vmatprep.subr.mxu0 %v242
  %442 = vmatpush1.msra.mxu0 %v241
  %443 = vmatprep.subr.mxu0 0.0
  %444 = vmatpush2.msra.mxu0 0.0
  %445 = vmatprep.subr.mxu0 0.0
  %446 = vmatpush2.msra.mxu0 0.0
  %447 = vmatprep.subr.mxu0 0.0
  %448 = vmatpush2.msra.mxu0 0.0
  %449 = vmatprep.subr.mxu0 0.0
  %450 = vmatpush2.msra.mxu0 0.0
  %451 = vmatprep.subr.mxu0 0.0
  %452 = vmatpush2.msra.mxu0 0.0
  %453 = vmatprep.subr.mxu0 0.0
  %454 = vmatpush2.msra.mxu0 0.0
  %455 = vmatprep.subr.mxu0 0.0
  %456 = vmatpush2.msra.mxu0 0.0
  %457 = vmatprep.subr.mxu0 0.0
  %458 = vmatpush2.msra.mxu0 0.0
  %459 = vmatprep.subr.mxu0 0.0
  %460 = vmatpush2.msra.mxu0 0.0
  %461 = vmatprep.subr.mxu0 0.0
  %462 = vmatpush2.msra.mxu0 0.0
  %463 = vmatprep.subr.mxu0 0.0
  %464 = vmatpush2.msra.mxu0 0.0
  %465 = vmatprep.subr.mxu0 0.0
  %466 = vmatpush2.msra.mxu0 0.0
  %467 = vmatprep.subr.mxu0 0.0
  %468 = vmatpush2.msra.mxu0 0.0
  %469 = vmatprep.subr.mxu0 0.0
  %470 = vmatpush2.msra.mxu0 0.0
  %471 = vmatprep.subr.mxu0 0.0
  %472 = vmatpush2.msra.mxu0 0.0
  %473 = vmatprep.subr.mxu0 0.0
  %474 = vmatpush2.msra.mxu0 0.0
  %475 = vmatprep.mubr.f32.mxu0 0.0
  %476 = vmatmul.mubr.f32.gmra.mxu0 %v316
  %v477 = vpop.f32.mrf.mxu0
  %v478 = vadd.f32 %v312, %v477
  %v479 = vpop.f32.mrf.mxu0
  %v480 = vadd.f32 %v312, %v479
  %481 = vdwg.mxu0
  %482 = vmatprep.subr.mxu0 0.0
  %483 = vmatpush1.msra.mxu0 0.0
  %484 = vmatprep.subr.mxu0 0.0
  %485 = vmatpush1.msra.mxu0 0.0
  %486 = vmatprep.subr.mxu0 0.0
  %487 = vmatpush1.msra.mxu0 0.0
  %488 = vmatprep.subr.mxu0 0.0
  %489 = vmatpush1.msra.mxu0 0.0
  %490 = vmatprep.subr.mxu0 0.0
  %491 = vmatpush1.msra.mxu0 0.0
  %492 = vmatprep.subr.mxu0 0.0
  %493 = vmatpush1.msra.mxu0 0.0
  %494 = vmatprep.subr.mxu0 %v335
  %495 = vmatpush1.msra.mxu0 %v332
  %496 = vmatprep.subr.mxu0 %v300
  %497 = vmatpush1.msra.mxu0 %v299
  %498 = vmatprep.subr.mxu0 %v293
  %499 = vmatpush1.msra.mxu0 %v292
  %500 = vmatprep.subr.mxu0 %v286
  %501 = vmatpush1.msra.mxu0 %v285
  %502 = vmatprep.subr.mxu0 %v279
  %503 = vmatpush1.msra.mxu0 %v278
  %504 = vmatprep.subr.mxu0 %v272
  %505 = vmatpush1.msra.mxu0 %v271
  %506 = vmatprep.subr.mxu0 %v265
  %507 = vmatpush1.msra.mxu0 %v264
  %508 = vmatprep.subr.mxu0 %v258
  %509 = vmatpush1.msra.mxu0 %v257
  %510 = vmatprep.subr.mxu0 %v251
  %511 = vmatpush1.msra.mxu0 %v250
  %512 = vmatprep.subr.mxu0 %v244
  %513 = vmatpush1.msra.mxu0 %v243
  %514 = vmatprep.subr.mxu0 0.0
  %515 = vmatpush2.msra.mxu0 0.0
  %516 = vmatprep.subr.mxu0 0.0
  %517 = vmatpush2.msra.mxu0 0.0
  %518 = vmatprep.subr.mxu0 0.0
  %519 = vmatpush2.msra.mxu0 0.0
  %520 = vmatprep.subr.mxu0 0.0
  %521 = vmatpush2.msra.mxu0 0.0
  %522 = vmatprep.subr.mxu0 0.0
  %523 = vmatpush2.msra.mxu0 0.0
  %524 = vmatprep.subr.mxu0 0.0
  %525 = vmatpush2.msra.mxu0 0.0
  %526 = vmatprep.subr.mxu0 0.0
  %527 = vmatpush2.msra.mxu0 0.0
  %528 = vmatprep.subr.mxu0 0.0
  %529 = vmatpush2.msra.mxu0 0.0
  %530 = vmatprep.subr.mxu0 0.0
  %531 = vmatpush2.msra.mxu0 0.0
  %532 = vmatprep.subr.mxu0 0.0
  %533 = vmatpush2.msra.mxu0 0.0
  %534 = vmatprep.subr.mxu0 0.0
  %535 = vmatpush2.msra.mxu0 0.0
  %536 = vmatprep.subr.mxu0 0.0
  %537 = vmatpush2.msra.mxu0 0.0
  %538 = vmatprep.subr.mxu0 0.0
  %539 = vmatpush2.msra.mxu0 0.0
  %540 = vmatprep.subr.mxu0 0.0
  %541 = vmatpush2.msra.mxu0 0.0
  %542 = vmatprep.subr.mxu0 0.0
  %543 = vmatpush2.msra.mxu0 0.0
  %544 = vmatprep.subr.mxu0 0.0
  %545 = vmatpush2.msra.mxu0 0.0
  %546 = vmatprep.mubr.f32.mxu0 0.0
  %547 = vmatmul.mubr.f32.gmra.mxu0 %v316
  %v548 = vpop.f32.mrf.mxu0
  %v549 = vadd.f32 %v312, %v548
  %v550 = vpop.f32.mrf.mxu0
  %v551 = vadd.f32 %v312, %v550
  %552 = vdwg.mxu0
  %553 = vmatprep.subr.mxu0 0.0
  %554 = vmatpush1.msra.mxu0 0.0
  %555 = vmatprep.subr.mxu0 0.0
  %556 = vmatpush1.msra.mxu0 0.0
  %557 = vmatprep.subr.mxu0 0.0
  %558 = vmatpush1.msra.mxu0 0.0
  %559 = vmatprep.subr.mxu0 0.0
  %560 = vmatpush1.msra.mxu0 0.0
  %561 = vmatprep.subr.mxu0 0.0
  %562 = vmatpush1.msra.mxu0 0.0
  %563 = vmatprep.subr.mxu0 0.0
  %564 = vmatpush1.msra.mxu0 0.0
  %565 = vmatprep.subr.mxu0 0.0
  %566 = vmatpush1.msra.mxu0 %v338
  %567 = vmatprep.subr.mxu0 0.0
  %568 = vmatpush1.msra.mxu0 %v301
  %569 = vmatprep.subr.mxu0 0.0
  %570 = vmatpush1.msra.mxu0 %v294
  %571 = vmatprep.subr.mxu0 0.0
  %572 = vmatpush1.msra.mxu0 %v287
  %573 = vmatprep.subr.mxu0 0.0
  %574 = vmatpush1.msra.mxu0 %v280
  %575 = vmatprep.subr.mxu0 0.0
  %576 = vmatpush1.msra.mxu0 %v273
  %577 = vmatprep.subr.mxu0 0.0
  %578 = vmatpush1.msra.mxu0 %v266
  %579 = vmatprep.subr.mxu0 0.0
  %580 = vmatpush1.msra.mxu0 %v259
  %581 = vmatprep.subr.mxu0 0.0
  %582 = vmatpush1.msra.mxu0 %v252
  %583 = vmatprep.subr.mxu0 0.0
  %584 = vmatpush1.msra.mxu0 %v245
  %585 = vmatprep.subr.mxu0 0.0
  %586 = vmatpush2.msra.mxu0 0.0
  %587 = vmatprep.subr.mxu0 0.0
  %588 = vmatpush2.msra.mxu0 0.0
  %589 = vmatprep.subr.mxu0 0.0
  %590 = vmatpush2.msra.mxu0 0.0
  %591 = vmatprep.subr.mxu0 0.0
  %592 = vmatpush2.msra.mxu0 0.0
  %593 = vmatprep.subr.mxu0 0.0
  %594 = vmatpush2.msra.mxu0 0.0
  %595 = vmatprep.subr.mxu0 0.0
  %596 = vmatpush2.msra.mxu0 0.0
  %597 = vmatprep.subr.mxu0 0.0
  %598 = vmatpush2.msra.mxu0 0.0
  %599 = vmatprep.subr.mxu0 0.0
  %600 = vmatpush2.msra.mxu0 0.0
  %601 = vmatprep.subr.mxu0 0.0
  %602 = vmatpush2.msra.mxu0 0.0
  %603 = vmatprep.subr.mxu0 0.0
  %604 = vmatpush2.msra.mxu0 0.0
  %605 = vmatprep.subr.mxu0 0.0
  %606 = vmatpush2.msra.mxu0 0.0
  %607 = vmatprep.subr.mxu0 0.0
  %608 = vmatpush2.msra.mxu0 0.0
  %609 = vmatprep.subr.mxu0 0.0
  %610 = vmatpush2.msra.mxu0 0.0
  %611 = vmatprep.subr.mxu0 0.0
  %612 = vmatpush2.msra.mxu0 0.0
  %613 = vmatprep.subr.mxu0 0.0
  %614 = vmatpush2.msra.mxu0 0.0
  %615 = vmatprep.subr.mxu0 0.0
  %616 = vmatpush2.msra.mxu0 0.0
  %617 = vmatprep.mubr.f32.mxu0 0.0
  %618 = vmatmul.mubr.f32.gmra.mxu0 %v316
  %v619 = vpop.f32.mrf.mxu0
  %v620 = vadd.f32 %v312, %v619
  %v621 = vpop.f32.mrf.mxu0
  %622 = vdwg.mxu0
  %v623 = vtanh.pop %v407
  %v624 = vtanh.pop %v409
  %v625 = vtanh.pop %v478
  %v626 = vtanh.pop %v480
  %v627 = vtanh.pop %v549
  %v628 = vtanh.pop %v551
  %v629 = vtanh.pop %v620
  %vm630 = vcmask 130048
  %v632 = vsel %vm630, %v629, 0
  %634 = vmatprep.subr.mxu0 %v74
  %635 = vmatpush1.msra.mxu0 %v73
  %636 = vmatprep.subr.mxu0 %v72
  %637 = vmatpush1.msra.mxu0 %v71
  %638 = vmatprep.subr.mxu0 %v70
  %639 = vmatpush1.msra.mxu0 %v69
  %640 = vmatprep.subr.mxu0 %v68
  %641 = vmatpush1.msra.mxu0 %v67
  %642 = vmatprep.subr.mxu0 %v66
  %643 = vmatpush1.msra.mxu0 %v65
  %644 = vmatprep.subr.mxu0 %v64
  %645 = vmatpush1.msra.mxu0 %v63
  %646 = vmatprep.subr.mxu0 %v62
  %647 = vmatpush1.msra.mxu0 %v61
  %648 = vmatprep.subr.mxu0 %v60
  %649 = vmatpush1.msra.mxu0 %v59
  %650 = vmatprep.subr.mxu0 %v58
  %651 = vmatpush1.msra.mxu0 %v57
  %652 = vmatprep.subr.mxu0 %v56
  %653 = vmatpush1.msra.mxu0 %v55
  %654 = vmatprep.subr.mxu0 %v54
  %655 = vmatpush1.msra.mxu0 %v53
  %656 = vmatprep.subr.mxu0 %v52
  %657 = vmatpush1.msra.mxu0 %v51
  %658 = vmatprep.subr.mxu0 %v50
  %659 = vmatpush1.msra.mxu0 %v49
  %660 = vmatprep.subr.mxu0 %v48
  %661 = vmatpush1.msra.mxu0 %v47
  %662 = vmatprep.subr.mxu0 %v46
  %663 = vmatpush1.msra.mxu0 %v45
  %664 = vmatprep.subr.mxu0 %v44
  %665 = vmatpush1.msra.mxu0 %v43
  %666 = vmatprep.subr.mxu0 %v106
  %667 = vmatpush2.msra.mxu0 %v105
  %668 = vmatprep.subr.mxu0 %v104
  %669 = vmatpush2.msra.mxu0 %v103
  %670 = vmatprep.subr.mxu0 %v102
  %671 = vmatpush2.msra.mxu0 %v101
  %672 = vmatprep.subr.mxu0 %v100
  %673 = vmatpush2.msra.mxu0 %v99
  %674 = vmatprep.subr.mxu0 %v98
  %675 = vmatpush2.msra.mxu0 %v97
  %676 = vmatprep.subr.mxu0 %v96
  %677 = vmatpush2.msra.mxu0 %v95
  %678 = vmatprep.subr.mxu0 %v94
  %679 = vmatpush2.msra.mxu0 %v93
  %680 = vmatprep.subr.mxu0 %v92
  %681 = vmatpush2.msra.mxu0 %v91
  %682 = vmatprep.subr.mxu0 %v90
  %683 = vmatpush2.msra.mxu0 %v89
  %684 = vmatprep.subr.mxu0 %v88
  %685 = vmatpush2.msra.mxu0 %v87
  %686 = vmatprep.subr.mxu0 %v86
  %687 = vmatpush2.msra.mxu0 %v85
  %688 = vmatprep.subr.mxu0 %v84
  %689 = vmatpush2.msra.mxu0 %v83
  %690 = vmatprep.subr.mxu0 %v82
  %691 = vmatpush2.msra.mxu0 %v81
  %692 = vmatprep.subr.mxu0 %v80
  %693 = vmatpush2.msra.mxu0 %v79
  %694 = vmatprep.subr.mxu0 %v78
  %695 = vmatpush2.msra.mxu0 %v77
  %696 = vmatprep.subr.mxu0 %v76
  %697 = vmatpush2.msra.mxu0 %v75
  %698 = vmatprep.mubr.f32.mxu0 %v624
  %699 = vmatmul.mubr.f32.gmra.mxu0 %v623
  %v700 = vpop.f32.mrf.mxu0
  %v701 = vadd.f32 0.0, %v700
  %v702 = vpop.f32.mrf.mxu0
  %v703 = vadd.f32 0.0, %v702
  %704 = vdwg.mxu0
  %705 = vmatprep.subr.mxu0 %v138
  %706 = vmatpush1.msra.mxu0 %v137
  %707 = vmatprep.subr.mxu0 %v136
  %708 = vmatpush1.msra.mxu0 %v135
  %709 = vmatprep.subr.mxu0 %v134
  %710 = vmatpush1.msra.mxu0 %v133
  %711 = vmatprep.subr.mxu0 %v132
  %712 = vmatpush1.msra.mxu0 %v131
  %713 = vmatprep.subr.mxu0 %v130
  %714 = vmatpush1.msra.mxu0 %v129
  %715 = vmatprep.subr.mxu0 %v128
  %716 = vmatpush1.msra.mxu0 %v127
  %717 = vmatprep.subr.mxu0 %v126
  %718 = vmatpush1.msra.mxu0 %v125
  %719 = vmatprep.subr.mxu0 %v124
  %720 = vmatpush1.msra.mxu0 %v123
  %721 = vmatprep.subr.mxu0 %v122
  %722 = vmatpush1.msra.mxu0 %v121
  %723 = vmatprep.subr.mxu0 %v120
  %724 = vmatpush1.msra.mxu0 %v119
  %725 = vmatprep.subr.mxu0 %v118
  %726 = vmatpush1.msra.mxu0 %v117
  %727 = vmatprep.subr.mxu0 %v116
  %728 = vmatpush1.msra.mxu0 %v115
  %729 = vmatprep.subr.mxu0 %v114
  %730 = vmatpush1.msra.mxu0 %v113
  %731 = vmatprep.subr.mxu0 %v112
  %732 = vmatpush1.msra.mxu0 %v111
  %733 = vmatprep.subr.mxu0 %v110
  %734 = vmatpush1.msra.mxu0 %v109
  %735 = vmatprep.subr.mxu0 %v108
  %736 = vmatpush1.msra.mxu0 %v107
  %737 = vmatprep.subr.mxu0 %v170
  %738 = vmatpush2.msra.mxu0 %v169
  %739 = vmatprep.subr.mxu0 %v168
  %740 = vmatpush2.msra.mxu0 %v167
  %741 = vmatprep.subr.mxu0 %v166
  %742 = vmatpush2.msra.mxu0 %v165
  %743 = vmatprep.subr.mxu0 %v164
  %744 = vmatpush2.msra.mxu0 %v163
  %745 = vmatprep.subr.mxu0 %v162
  %746 = vmatpush2.msra.mxu0 %v161
  %747 = vmatprep.subr.mxu0 %v160
  %748 = vmatpush2.msra.mxu0 %v159
  %749 = vmatprep.subr.mxu0 %v158
  %750 = vmatpush2.msra.mxu0 %v157
  %751 = vmatprep.subr.mxu0 %v156
  %752 = vmatpush2.msra.mxu0 %v155
  %753 = vmatprep.subr.mxu0 %v154
  %754 = vmatpush2.msra.mxu0 %v153
  %755 = vmatprep.subr.mxu0 %v152
  %756 = vmatpush2.msra.mxu0 %v151
  %757 = vmatprep.subr.mxu0 %v150
  %758 = vmatpush2.msra.mxu0 %v149
  %759 = vmatprep.subr.mxu0 %v148
  %760 = vmatpush2.msra.mxu0 %v147
  %761 = vmatprep.subr.mxu0 %v146
  %762 = vmatpush2.msra.mxu0 %v145
  %763 = vmatprep.subr.mxu0 %v144
  %764 = vmatpush2.msra.mxu0 %v143
  %765 = vmatprep.subr.mxu0 %v142
  %766 = vmatpush2.msra.mxu0 %v141
  %767 = vmatprep.subr.mxu0 %v140
  %768 = vmatpush2.msra.mxu0 %v139
  %769 = vmatprep.mubr.f32.mxu0 %v626
  %770 = vmatmul.mubr.f32.gmra.mxu0 %v625
  %v771 = vpop.f32.mrf.mxu0
  %v772 = vadd.f32 %v701, %v771
  %v773 = vpop.f32.mrf.mxu0
  %v774 = vadd.f32 %v703, %v773
  %775 = vdwg.mxu0
  %776 = vmatprep.subr.mxu0 %v202
  %777 = vmatpush1.msra.mxu0 %v201
  %778 = vmatprep.subr.mxu0 %v200
  %779 = vmatpush1.msra.mxu0 %v199
  %780 = vmatprep.subr.mxu0 %v198
  %781 = vmatpush1.msra.mxu0 %v197
  %782 = vmatprep.subr.mxu0 %v196
  %783 = vmatpush1.msra.mxu0 %v195
  %784 = vmatprep.subr.mxu0 %v194
  %785 = vmatpush1.msra.mxu0 %v193
  %786 = vmatprep.subr.mxu0 %v192
  %787 = vmatpush1.msra.mxu0 %v191
  %788 = vmatprep.subr.mxu0 %v190
  %789 = vmatpush1.msra.mxu0 %v189
  %790 = vmatprep.subr.mxu0 %v188
  %791 = vmatpush1.msra.mxu0 %v187
  %792 = vmatprep.subr.mxu0 %v186
  %793 = vmatpush1.msra.mxu0 %v185
  %794 = vmatprep.subr.mxu0 %v184
  %795 = vmatpush1.msra.mxu0 %v183
  %796 = vmatprep.subr.mxu0 %v182
  %797 = vmatpush1.msra.mxu0 %v181
  %798 = vmatprep.subr.mxu0 %v180
  %799 = vmatpush1.msra.mxu0 %v179
  %800 = vmatprep.subr.mxu0 %v178
  %801 = vmatpush1.msra.mxu0 %v177
  %802 = vmatprep.subr.mxu0 %v176
  %803 = vmatpush1.msra.mxu0 %v175
  %804 = vmatprep.subr.mxu0 %v174
  %805 = vmatpush1.msra.mxu0 %v173
  %806 = vmatprep.subr.mxu0 %v172
  %807 = vmatpush1.msra.mxu0 %v171
  %808 = vmatprep.subr.mxu0 %v234
  %809 = vmatpush2.msra.mxu0 %v233
  %810 = vmatprep.subr.mxu0 %v232
  %811 = vmatpush2.msra.mxu0 %v231
  %812 = vmatprep.subr.mxu0 %v230
  %813 = vmatpush2.msra.mxu0 %v229
  %814 = vmatprep.subr.mxu0 %v228
  %815 = vmatpush2.msra.mxu0 %v227
  %816 = vmatprep.subr.mxu0 %v226
  %817 = vmatpush2.msra.mxu0 %v225
  %818 = vmatprep.subr.mxu0 %v224
  %819 = vmatpush2.msra.mxu0 %v223
  %820 = vmatprep.subr.mxu0 %v222
  %821 = vmatpush2.msra.mxu0 %v221
  %822 = vmatprep.subr.mxu0 %v220
  %823 = vmatpush2.msra.mxu0 %v219
  %824 = vmatprep.subr.mxu0 %v218
  %825 = vmatpush2.msra.mxu0 %v217
  %826 = vmatprep.subr.mxu0 %v216
  %827 = vmatpush2.msra.mxu0 %v215
  %828 = vmatprep.subr.mxu0 %v214
  %829 = vmatpush2.msra.mxu0 %v213
  %830 = vmatprep.subr.mxu0 %v212
  %831 = vmatpush2.msra.mxu0 %v211
  %832 = vmatprep.subr.mxu0 %v210
  %833 = vmatpush2.msra.mxu0 %v209
  %834 = vmatprep.subr.mxu0 %v208
  %835 = vmatpush2.msra.mxu0 %v207
  %836 = vmatprep.subr.mxu0 %v206
  %837 = vmatpush2.msra.mxu0 %v205
  %838 = vmatprep.subr.mxu0 %v204
  %839 = vmatpush2.msra.mxu0 %v203
  %840 = vmatprep.mubr.f32.mxu0 %v628
  %841 = vmatmul.mubr.f32.gmra.mxu0 %v627
  %v842 = vpop.f32.mrf.mxu0
  %v843 = vadd.f32 %v772, %v842
  %v844 = vpop.f32.mrf.mxu0
  %v845 = vadd.f32 %v774, %v844
  %846 = vdwg.mxu0
  %847 = vmatprep.subr.mxu0 0.0
  %848 = vmatpush1.msra.mxu0 0.0
  %849 = vmatprep.subr.mxu0 0.0
  %850 = vmatpush1.msra.mxu0 0.0
  %851 = vmatprep.subr.mxu0 0.0
  %852 = vmatpush1.msra.mxu0 0.0
  %853 = vmatprep.subr.mxu0 0.0
  %854 = vmatpush1.msra.mxu0 0.0
  %855 = vmatprep.subr.mxu0 0.0
  %856 = vmatpush1.msra.mxu0 0.0
  %857 = vmatprep.subr.mxu0 0.0
  %858 = vmatpush1.msra.mxu0 0.0
  %859 = vmatprep.subr.mxu0 0.0
  %860 = vmatpush1.msra.mxu0 0.0
  %861 = vmatprep.subr.mxu0 0.0
  %862 = vmatpush1.msra.mxu0 0.0
  %863 = vmatprep.subr.mxu0 0.0
  %864 = vmatpush1.msra.mxu0 0.0
  %865 = vmatprep.subr.mxu0 0.0
  %866 = vmatpush1.msra.mxu0 0.0
  %867 = vmatprep.subr.mxu0 0.0
  %868 = vmatpush1.msra.mxu0 0.0
  %869 = vmatprep.subr.mxu0 0.0
  %870 = vmatpush1.msra.mxu0 0.0
  %871 = vmatprep.subr.mxu0 0.0
  %872 = vmatpush1.msra.mxu0 0.0
  %873 = vmatprep.subr.mxu0 0.0
  %874 = vmatpush1.msra.mxu0 0.0
  %875 = vmatprep.subr.mxu0 %v238
  %876 = vmatpush1.msra.mxu0 %v237
  %877 = vmatprep.subr.mxu0 %v236
  %878 = vmatpush1.msra.mxu0 %v235
  %879 = vmatprep.subr.mxu0 0.0
  %880 = vmatpush2.msra.mxu0 0.0
  %881 = vmatprep.subr.mxu0 0.0
  %882 = vmatpush2.msra.mxu0 0.0
  %883 = vmatprep.subr.mxu0 0.0
  %884 = vmatpush2.msra.mxu0 0.0
  %885 = vmatprep.subr.mxu0 0.0
  %886 = vmatpush2.msra.mxu0 0.0
  %887 = vmatprep.subr.mxu0 0.0
  %888 = vmatpush2.msra.mxu0 0.0
  %889 = vmatprep.subr.mxu0 0.0
  %890 = vmatpush2.msra.mxu0 0.0
  %891 = vmatprep.subr.mxu0 0.0
  %892 = vmatpush2.msra.mxu0 0.0
  %893 = vmatprep.subr.mxu0 0.0
  %894 = vmatpush2.msra.mxu0 0.0
  %895 = vmatprep.subr.mxu0 0.0
  %896 = vmatpush2.msra.mxu0 0.0
  %897 = vmatprep.subr.mxu0 0.0
  %898 = vmatpush2.msra.mxu0 0.0
  %899 = vmatprep.subr.mxu0 0.0
  %900 = vmatpush2.msra.mxu0 0.0
  %901 = vmatprep.subr.mxu0 0.0
  %902 = vmatpush2.msra.mxu0 0.0
  %903 = vmatprep.subr.mxu0 0.0
  %904 = vmatpush2.msra.mxu0 0.0
  %905 = vmatprep.subr.mxu0 0.0
  %906 = vmatpush2.msra.mxu0 0.0
  %907 = vmatprep.subr.mxu0 0.0
  %908 = vmatpush2.msra.mxu0 0.0
  %909 = vmatprep.subr.mxu0 0.0
  %910 = vmatpush2.msra.mxu0 0.0
  %911 = vmatprep.mubr.f32.mxu0 0.0
  %912 = vmatmul.mubr.f32.gmra.mxu0 %v632
  %v913 = vpop.f32.mrf.mxu0
  %v914 = vadd.f32 %v843, %v913
  %v915 = vpop.f32.mrf.mxu0
  %v916 = vadd.f32 %v845, %v915
  %917 = vdwg.mxu0
  %s918 = scalar_lea.vmem %s0, 560
  %v919 = vld [vmem:[%s918] sm:$0xff]
  %v920 = vld [vmem:[%s918 + $0x8] sm:$0xff]
  %v921 = vld [vmem:[%s918 + $0x10] sm:$0xff]
  %v922 = vld [vmem:[%s918 + $0x18] sm:$0xff]
  %v923 = vld [vmem:[%s918 + $0x20] sm:$0xff]
  %v924 = vld [vmem:[%s918 + $0x28] sm:$0xff]
  %v925 = vld [vmem:[%s918 + $0x30] sm:$0xff]
  %v926 = vld [vmem:[%s918 + $0x38] sm:$0xff]
  %v927 = vld [vmem:[%s918 + $0x40] sm:$0xff]
  %v928 = vld [vmem:[%s918 + $0x48] sm:$0xff]
  %v929 = vld [vmem:[%s918 + $0x50] sm:$0xff]
  %v930 = vld [vmem:[%s918 + $0x58] sm:$0xff]
  %v931 = vld [vmem:[%s918 + $0x60] sm:$0xff]
  %v932 = vld [vmem:[%s918 + $0x68] sm:$0xff]
  %v933 = vld [vmem:[%s918 + $0x70] sm:$0xff]
  %v934 = vld [vmem:[%s918 + $0x78] sm:$0xff]
  %v935 = vld [vmem:[%s918 + $0x80] sm:$0xff]
  %v936 = vld [vmem:[%s918 + $0x88] sm:$0xff]
  %v937 = vld [vmem:[%s918 + $0x90] sm:$0xff]
  %v938 = vld [vmem:[%s918 + $0x98] sm:$0xff]
  %v939 = vld [vmem:[%s918 + $0xa0] sm:$0xff]
  %v940 = vld [vmem:[%s918 + $0xa8] sm:$0xff]
  %v941 = vld [vmem:[%s918 + $0xb0] sm:$0xff]
  %v942 = vld [vmem:[%s918 + $0xb8] sm:$0xff]
  %v943 = vld [vmem:[%s918 + $0xc0] sm:$0xff]
  %v944 = vld [vmem:[%s918 + $0xc8] sm:$0xff]
  %v945 = vld [vmem:[%s918 + $0xd0] sm:$0xff]
  %v946 = vld [vmem:[%s918 + $0xd8] sm:$0xff]
  %v947 = vld [vmem:[%s918 + $0xe0] sm:$0xff]
  %v948 = vld [vmem:[%s918 + $0xe8] sm:$0xff]
  %v949 = vld [vmem:[%s918 + $0xf0] sm:$0xff]
  %v950 = vld [vmem:[%s918 + $0xf8] sm:$0xff]
  %v951 = vld [vmem:[%s918 + $0x100] sm:$0xff]
  %v952 = vld [vmem:[%s918 + $0x108] sm:$0xff]
  %v953 = vld [vmem:[%s918 + $0x110] sm:$0xff]
  %v954 = vld [vmem:[%s918 + $0x118] sm:$0xff]
  %v955 = vld [vmem:[%s918 + $0x120] sm:$0xff]
  %v956 = vld [vmem:[%s918 + $0x128] sm:$0xff]
  %v957 = vld [vmem:[%s918 + $0x130] sm:$0xff]
  %v958 = vld [vmem:[%s918 + $0x138] sm:$0xff]
  %v959 = vld [vmem:[%s918 + $0x140] sm:$0xff]
  %v960 = vld [vmem:[%s918 + $0x148] sm:$0xff]
  %v961 = vld [vmem:[%s918 + $0x150] sm:$0xff]
  %v962 = vld [vmem:[%s918 + $0x158] sm:$0xff]
  %v963 = vld [vmem:[%s918 + $0x160] sm:$0xff]
  %v964 = vld [vmem:[%s918 + $0x168] sm:$0xff]
  %v965 = vld [vmem:[%s918 + $0x170] sm:$0xff]
  %v966 = vld [vmem:[%s918 + $0x178] sm:$0xff]
  %v967 = vld [vmem:[%s918 + $0x180] sm:$0xff]
  %v968 = vld [vmem:[%s918 + $0x188] sm:$0xff]
  %v969 = vld [vmem:[%s918 + $0x190] sm:$0xff]
  %v970 = vld [vmem:[%s918 + $0x198] sm:$0xff]
  %v971 = vld [vmem:[%s918 + $0x1a0] sm:$0xff]
  %v972 = vld [vmem:[%s918 + $0x1a8] sm:$0xff]
  %v973 = vld [vmem:[%s918 + $0x1b0] sm:$0xff]
  %v974 = vld [vmem:[%s918 + $0x1b8] sm:$0xff]
  %v975 = vld [vmem:[%s918 + $0x1c0] sm:$0xff]
  %v976 = vld [vmem:[%s918 + $0x1c8] sm:$0xff]
  %v977 = vld [vmem:[%s918 + $0x1d0] sm:$0xff]
  %v978 = vld [vmem:[%s918 + $0x1d8] sm:$0xff]
  %v979 = vld [vmem:[%s918 + $0x1e0] sm:$0xff]
  %v980 = vld [vmem:[%s918 + $0x1e8] sm:$0xff]
  %v981 = vld [vmem:[%s918 + $0x1f0] sm:$0xff]
  %v982 = vld [vmem:[%s918 + $0x1f8] sm:$0x7]
  %v983 = vld [vmem:[%s918 + $0x200] sm:$0x7]
  %v984 = vld [vmem:[%s918 + $0x208] sm:$0x7]
  %v985 = vld [vmem:[%s918 + $0x210] sm:$0x7]
  %v986 = vld [vmem:[%s918 + $0x218] sm:$0x7]
  %v987 = vld [vmem:[%s918 + $0x220] sm:$0x7]
  %v988 = vld [vmem:[%s918 + $0x228] sm:$0x7]
  %v990 = vsel %vm318, %v982, 0
  %v993 = vsel %vm318, %v983, 0
  %v996 = vsel %vm318, %v984, 0
  %v999 = vsel %vm318, %v985, 0
  %v1002 = vsel %vm318, %v986, 0
  %v1005 = vsel %vm318, %v987, 0
  %v1008 = vsel %vm318, %v988, 0
  %1010 = vmatprep.subr.mxu0 0.0
  %1011 = vmatpush1.msra.mxu0 0.0
  %1012 = vmatprep.subr.mxu0 0.0
  %1013 = vmatpush1.msra.mxu0 0.0
  %1014 = vmatprep.subr.mxu0 0.0
  %1015 = vmatpush1.msra.mxu0 0.0
  %1016 = vmatprep.subr.mxu0 0.0
  %1017 = vmatpush1.msra.mxu0 0.0
  %1018 = vmatprep.subr.mxu0 0.0
  %1019 = vmatpush1.msra.mxu0 0.0
  %1020 = vmatprep.subr.mxu0 0.0
  %1021 = vmatpush1.msra.mxu0 0.0
  %1022 = vmatprep.subr.mxu0 %v993
  %1023 = vmatpush1.msra.mxu0 %v990
  %1024 = vmatprep.subr.mxu0 %v976
  %1025 = vmatpush1.msra.mxu0 %v975
  %1026 = vmatprep.subr.mxu0 %v969
  %1027 = vmatpush1.msra.mxu0 %v968
  %1028 = vmatprep.subr.mxu0 %v962
  %1029 = vmatpush1.msra.mxu0 %v961
  %1030 = vmatprep.subr.mxu0 %v955
  %1031 = vmatpush1.msra.mxu0 %v954
  %1032 = vmatprep.subr.mxu0 %v948
  %1033 = vmatpush1.msra.mxu0 %v947
  %1034 = vmatprep.subr.mxu0 %v941
  %1035 = vmatpush1.msra.mxu0 %v940
  %1036 = vmatprep.subr.mxu0 %v934
  %1037 = vmatpush1.msra.mxu0 %v933
  %1038 = vmatprep.subr.mxu0 %v927
  %1039 = vmatpush1.msra.mxu0 %v926
  %1040 = vmatprep.subr.mxu0 %v920
  %1041 = vmatpush1.msra.mxu0 %v919
  %1042 = vmatprep.subr.mxu0 0.0
  %1043 = vmatpush2.msra.mxu0 0.0
  %1044 = vmatprep.subr.mxu0 0.0
  %1045 = vmatpush2.msra.mxu0 0.0
  %1046 = vmatprep.subr.mxu0 0.0
  %1047 = vmatpush2.msra.mxu0 0.0
  %1048 = vmatprep.subr.mxu0 0.0
  %1049 = vmatpush2.msra.mxu0 0.0
  %1050 = vmatprep.subr.mxu0 0.0
  %1051 = vmatpush2.msra.mxu0 0.0
  %1052 = vmatprep.subr.mxu0 0.0
  %1053 = vmatpush2.msra.mxu0 0.0
  %1054 = vmatprep.subr.mxu0 0.0
  %1055 = vmatpush2.msra.mxu0 0.0
  %1056 = vmatprep.subr.mxu0 0.0
  %1057 = vmatpush2.msra.mxu0 0.0
  %1058 = vmatprep.subr.mxu0 0.0
  %1059 = vmatpush2.msra.mxu0 0.0
  %1060 = vmatprep.subr.mxu0 0.0
  %1061 = vmatpush2.msra.mxu0 0.0
  %1062 = vmatprep.subr.mxu0 0.0
  %1063 = vmatpush2.msra.mxu0 0.0
  %1064 = vmatprep.subr.mxu0 0.0
  %1065 = vmatpush2.msra.mxu0 0.0
  %1066 = vmatprep.subr.mxu0 0.0
  %1067 = vmatpush2.msra.mxu0 0.0
  %1068 = vmatprep.subr.mxu0 0.0
  %1069 = vmatpush2.msra.mxu0 0.0
  %1070 = vmatprep.subr.mxu0 0.0
  %1071 = vmatpush2.msra.mxu0 0.0
  %1072 = vmatprep.subr.mxu0 0.0
  %1073 = vmatpush2.msra.mxu0 0.0
  %1074 = vmatprep.mubr.f32.mxu0 0.0
  %1075 = vmatmul.mubr.f32.gmra.mxu0 %v316
  %v1076 = vpop.f32.mrf.mxu0
  %v1077 = vadd.f32 %v312, %v1076
  %v1078 = vpop.f32.mrf.mxu0
  %v1079 = vadd.f32 %v312, %v1078
  %1080 = vdwg.mxu0
  %1081 = vmatprep.subr.mxu0 0.0
  %1082 = vmatpush1.msra.mxu0 0.0
  %1083 = vmatprep.subr.mxu0 0.0
  %1084 = vmatpush1.msra.mxu0 0.0
  %1085 = vmatprep.subr.mxu0 0.0
  %1086 = vmatpush1.msra.mxu0 0.0
  %1087 = vmatprep.subr.mxu0 0.0
  %1088 = vmatpush1.msra.mxu0 0.0
  %1089 = vmatprep.subr.mxu0 0.0
  %1090 = vmatpush1.msra.mxu0 0.0
  %1091 = vmatprep.subr.mxu0 0.0
  %1092 = vmatpush1.msra.mxu0 0.0
  %1093 = vmatprep.subr.mxu0 %v999
  %1094 = vmatpush1.msra.mxu0 %v996
  %1095 = vmatprep.subr.mxu0 %v978
  %1096 = vmatpush1.msra.mxu0 %v977
  %1097 = vmatprep.subr.mxu0 %v971
  %1098 = vmatpush1.msra.mxu0 %v970
  %1099 = vmatprep.subr.mxu0 %v964
  %1100 = vmatpush1.msra.mxu0 %v963
  %1101 = vmatprep.subr.mxu0 %v957
  %1102 = vmatpush1.msra.mxu0 %v956
  %1103 = vmatprep.subr.mxu0 %v950
  %1104 = vmatpush1.msra.mxu0 %v949
  %1105 = vmatprep.subr.mxu0 %v943
  %1106 = vmatpush1.msra.mxu0 %v942
  %1107 = vmatprep.subr.mxu0 %v936
  %1108 = vmatpush1.msra.mxu0 %v935
  %1109 = vmatprep.subr.mxu0 %v929
  %1110 = vmatpush1.msra.mxu0 %v928
  %1111 = vmatprep.subr.mxu0 %v922
  %1112 = vmatpush1.msra.mxu0 %v921
  %1113 = vmatprep.subr.mxu0 0.0
  %1114 = vmatpush2.msra.mxu0 0.0
  %1115 = vmatprep.subr.mxu0 0.0
  %1116 = vmatpush2.msra.mxu0 0.0
  %1117 = vmatprep.subr.mxu0 0.0
  %1118 = vmatpush2.msra.mxu0 0.0
  %1119 = vmatprep.subr.mxu0 0.0
  %1120 = vmatpush2.msra.mxu0 0.0
  %1121 = vmatprep.subr.mxu0 0.0
  %1122 = vmatpush2.msra.mxu0 0.0
  %1123 = vmatprep.subr.mxu0 0.0
  %1124 = vmatpush2.msra.mxu0 0.0
  %1125 = vmatprep.subr.mxu0 0.0
  %1126 = vmatpush2.msra.mxu0 0.0
  %1127 = vmatprep.subr.mxu0 0.0
  %1128 = vmatpush2.msra.mxu0 0.0
  %1129 = vmatprep.subr.mxu0 0.0
  %1130 = vmatpush2.msra.mxu0 0.0
  %1131 = vmatprep.subr.mxu0 0.0
  %1132 = vmatpush2.msra.mxu0 0.0
  %1133 = vmatprep.subr.mxu0 0.0
  %1134 = vmatpush2.msra.mxu0 0.0
  %1135 = vmatprep.subr.mxu0 0.0
  %1136 = vmatpush2.msra.mxu0 0.0
  %1137 = vmatprep.subr.mxu0 0.0
  %1138 = vmatpush2.msra.mxu0 0.0
  %1139 = vmatprep.subr.mxu0 0.0
  %1140 = vmatpush2.msra.mxu0 0.0
  %1141 = vmatprep.subr.mxu0 0.0
  %1142 = vmatpush2.msra.mxu0 0.0
  %1143 = vmatprep.subr.mxu0 0.0
  %1144 = vmatpush2.msra.mxu0 0.0
  %1145 = vmatprep.mubr.f32.mxu0 0.0
  %1146 = vmatmul.mubr.f32.gmra.mxu0 %v316
  %v1147 = vpop.f32.mrf.mxu0
  %v1148 = vadd.f32 %v312, %v1147
  %v1149 = vpop.f32.mrf.mxu0
  %v1150 = vadd.f32 %v312, %v1149
  %1151 = vdwg.mxu0
  %1152 = vmatprep.subr.mxu0 0.0
  %1153 = vmatpush1.msra.mxu0 0.0
  %1154 = vmatprep.subr.mxu0 0.0
  %1155 = vmatpush1.msra.mxu0 0.0
  %1156 = vmatprep.subr.mxu0 0.0
  %1157 = vmatpush1.msra.mxu0 0.0
  %1158 = vmatprep.subr.mxu0 0.0
  %1159 = vmatpush1.msra.mxu0 0.0
  %1160 = vmatprep.subr.mxu0 0.0
  %1161 = vmatpush1.msra.mxu0 0.0
  %1162 = vmatprep.subr.mxu0 0.0
  %1163 = vmatpush1.msra.mxu0 0.0
  %1164 = vmatprep.subr.mxu0 %v1005
  %1165 = vmatpush1.msra.mxu0 %v1002
  %1166 = vmatprep.subr.mxu0 %v980
  %1167 = vmatpush1.msra.mxu0 %v979
  %1168 = vmatprep.subr.mxu0 %v973
  %1169 = vmatpush1.msra.mxu0 %v972
  %1170 = vmatprep.subr.mxu0 %v966
  %1171 = vmatpush1.msra.mxu0 %v965
  %1172 = vmatprep.subr.mxu0 %v959
  %1173 = vmatpush1.msra.mxu0 %v958
  %1174 = vmatprep.subr.mxu0 %v952
  %1175 = vmatpush1.msra.mxu0 %v951
  %1176 = vmatprep.subr.mxu0 %v945
  %1177 = vmatpush1.msra.mxu0 %v944
  %1178 = vmatprep.subr.mxu0 %v938
  %1179 = vmatpush1.msra.mxu0 %v937
  %1180 = vmatprep.subr.mxu0 %v931
  %1181 = vmatpush1.msra.mxu0 %v930
  %1182 = vmatprep.subr.mxu0 %v924
  %1183 = vmatpush1.msra.mxu0 %v923
  %1184 = vmatprep.subr.mxu0 0.0
  %1185 = vmatpush2.msra.mxu0 0.0
  %1186 = vmatprep.subr.mxu0 0.0
  %1187 = vmatpush2.msra.mxu0 0.0
  %1188 = vmatprep.subr.mxu0 0.0
  %1189 = vmatpush2.msra.mxu0 0.0
  %1190 = vmatprep.subr.mxu0 0.0
  %1191 = vmatpush2.msra.mxu0 0.0
  %1192 = vmatprep.subr.mxu0 0.0
  %1193 = vmatpush2.msra.mxu0 0.0
  %1194 = vmatprep.subr.mxu0 0.0
  %1195 = vmatpush2.msra.mxu0 0.0
  %1196 = vmatprep.subr.mxu0 0.0
  %1197 = vmatpush2.msra.mxu0 0.0
  %1198 = vmatprep.subr.mxu0 0.0
  %1199 = vmatpush2.msra.mxu0 0.0
  %1200 = vmatprep.subr.mxu0 0.0
  %1201 = vmatpush2.msra.mxu0 0.0
  %1202 = vmatprep.subr.mxu0 0.0
  %1203 = vmatpush2.msra.mxu0 0.0
  %1204 = vmatprep.subr.mxu0 0.0
  %1205 = vmatpush2.msra.mxu0 0.0
  %1206 = vmatprep.subr.mxu0 0.0
  %1207 = vmatpush2.msra.mxu0 0.0
  %1208 = vmatprep.subr.mxu0 0.0
  %1209 = vmatpush2.msra.mxu0 0.0
  %1210 = vmatprep.subr.mxu0 0.0
  %1211 = vmatpush2.msra.mxu0 0.0
  %1212 = vmatprep.subr.mxu0 0.0
  %1213 = vmatpush2.msra.mxu0 0.0
  %1214 = vmatprep.subr.mxu0 0.0
  %1215 = vmatpush2.msra.mxu0 0.0
  %1216 = vmatprep.mubr.f32.mxu0 0.0
  %1217 = vmatmul.mubr.f32.gmra.mxu0 %v316
  %v1218 = vpop.f32.mrf.mxu0
  %v1219 = vadd.f32 %v312, %v1218
  %v1220 = vpop.f32.mrf.mxu0
  %v1221 = vadd.f32 %v312, %v1220
  %1222 = vdwg.mxu0
  %1223 = vmatprep.subr.mxu0 0.0
  %1224 = vmatpush1.msra.mxu0 0.0
  %1225 = vmatprep.subr.mxu0 0.0
  %1226 = vmatpush1.msra.mxu0 0.0
  %1227 = vmatprep.subr.mxu0 0.0
  %1228 = vmatpush1.msra.mxu0 0.0
  %1229 = vmatprep.subr.mxu0 0.0
  %1230 = vmatpush1.msra.mxu0 0.0
  %1231 = vmatprep.subr.mxu0 0.0
  %1232 = vmatpush1.msra.mxu0 0.0
  %1233 = vmatprep.subr.mxu0 0.0
  %1234 = vmatpush1.msra.mxu0 0.0
  %1235 = vmatprep.subr.mxu0 0.0
  %1236 = vmatpush1.msra.mxu0 %v1008
  %1237 = vmatprep.subr.mxu0 0.0
  %1238 = vmatpush1.msra.mxu0 %v981
  %1239 = vmatprep.subr.mxu0 0.0
  %1240 = vmatpush1.msra.mxu0 %v974
  %1241 = vmatprep.subr.mxu0 0.0
  %1242 = vmatpush1.msra.mxu0 %v967
  %1243 = vmatprep.subr.mxu0 0.0
  %1244 = vmatpush1.msra.mxu0 %v960
  %1245 = vmatprep.subr.mxu0 0.0
  %1246 = vmatpush1.msra.mxu0 %v953
  %1247 = vmatprep.subr.mxu0 0.0
  %1248 = vmatpush1.msra.mxu0 %v946
  %1249 = vmatprep.subr.mxu0 0.0
  %1250 = vmatpush1.msra.mxu0 %v939
  %1251 = vmatprep.subr.mxu0 0.0
  %1252 = vmatpush1.msra.mxu0 %v932
  %1253 = vmatprep.subr.mxu0 0.0
  %1254 = vmatpush1.msra.mxu0 %v925
  %1255 = vmatprep.subr.mxu0 0.0
  %1256 = vmatpush2.msra.mxu0 0.0
  %1257 = vmatprep.subr.mxu0 0.0
  %1258 = vmatpush2.msra.mxu0 0.0
  %1259 = vmatprep.subr.mxu0 0.0
  %1260 = vmatpush2.msra.mxu0 0.0
  %1261 = vmatprep.subr.mxu0 0.0
  %1262 = vmatpush2.msra.mxu0 0.0
  %1263 = vmatprep.subr.mxu0 0.0
  %1264 = vmatpush2.msra.mxu0 0.0
  %1265 = vmatprep.subr.mxu0 0.0
  %1266 = vmatpush2.msra.mxu0 0.0
  %1267 = vmatprep.subr.mxu0 0.0
  %1268 = vmatpush2.msra.mxu0 0.0
  %1269 = vmatprep.subr.mxu0 0.0
  %1270 = vmatpush2.msra.mxu0 0.0
  %1271 = vmatprep.subr.mxu0 0.0
  %1272 = vmatpush2.msra.mxu0 0.0
  %1273 = vmatprep.subr.mxu0 0.0
  %1274 = vmatpush2.msra.mxu0 0.0
  %1275 = vmatprep.subr.mxu0 0.0
  %1276 = vmatpush2.msra.mxu0 0.0
  %1277 = vmatprep.subr.mxu0 0.0
  %1278 = vmatpush2.msra.mxu0 0.0
  %1279 = vmatprep.subr.mxu0 0.0
  %1280 = vmatpush2.msra.mxu0 0.0
  %1281 = vmatprep.subr.mxu0 0.0
  %1282 = vmatpush2.msra.mxu0 0.0
  %1283 = vmatprep.subr.mxu0 0.0
  %1284 = vmatpush2.msra.mxu0 0.0
  %1285 = vmatprep.subr.mxu0 0.0
  %1286 = vmatpush2.msra.mxu0 0.0
  %1287 = vmatprep.mubr.f32.mxu0 0.0
  %1288 = vmatmul.mubr.f32.gmra.mxu0 %v316
  %v1289 = vpop.f32.mrf.mxu0
  %v1290 = vadd.f32 %v312, %v1289
  %v1291 = vpop.f32.mrf.mxu0
  %1292 = vdwg.mxu0
  %v1293 = vtanh.pop %v1077
  %v1294 = vtanh.pop %v1079
  %v1295 = vtanh.pop %v1148
  %v1296 = vtanh.pop %v1150
  %v1297 = vtanh.pop %v1219
  %v1298 = vtanh.pop %v1221
  %v1299 = vtanh.pop %v1290
  %v1301 = vsel %vm630, %v1299, 0
  %1303 = vmatprep.subr.mxu0 %v74
  %1304 = vmatpush1.msra.mxu0 %v73
  %1305 = vmatprep.subr.mxu0 %v72
  %1306 = vmatpush1.msra.mxu0 %v71
  %1307 = vmatprep.subr.mxu0 %v70
  %1308 = vmatpush1.msra.mxu0 %v69
  %1309 = vmatprep.subr.mxu0 %v68
  %1310 = vmatpush1.msra.mxu0 %v67
  %1311 = vmatprep.subr.mxu0 %v66
  %1312 = vmatpush1.msra.mxu0 %v65
  %1313 = vmatprep.subr.mxu0 %v64
  %1314 = vmatpush1.msra.mxu0 %v63
  %1315 = vmatprep.subr.mxu0 %v62
  %1316 = vmatpush1.msra.mxu0 %v61
  %1317 = vmatprep.subr.mxu0 %v60
  %1318 = vmatpush1.msra.mxu0 %v59
  %1319 = vmatprep.subr.mxu0 %v58
  %1320 = vmatpush1.msra.mxu0 %v57
  %1321 = vmatprep.subr.mxu0 %v56
  %1322 = vmatpush1.msra.mxu0 %v55
  %1323 = vmatprep.subr.mxu0 %v54
  %1324 = vmatpush1.msra.mxu0 %v53
  %1325 = vmatprep.subr.mxu0 %v52
  %1326 = vmatpush1.msra.mxu0 %v51
  %1327 = vmatprep.subr.mxu0 %v50
  %1328 = vmatpush1.msra.mxu0 %v49
  %1329 = vmatprep.subr.mxu0 %v48
  %1330 = vmatpush1.msra.mxu0 %v47
  %1331 = vmatprep.subr.mxu0 %v46
  %1332 = vmatpush1.msra.mxu0 %v45
  %1333 = vmatprep.subr.mxu0 %v44
  %1334 = vmatpush1.msra.mxu0 %v43
  %1335 = vmatprep.subr.mxu0 %v106
  %1336 = vmatpush2.msra.mxu0 %v105
  %1337 = vmatprep.subr.mxu0 %v104
  %1338 = vmatpush2.msra.mxu0 %v103
  %1339 = vmatprep.subr.mxu0 %v102
  %1340 = vmatpush2.msra.mxu0 %v101
  %1341 = vmatprep.subr.mxu0 %v100
  %1342 = vmatpush2.msra.mxu0 %v99
  %1343 = vmatprep.subr.mxu0 %v98
  %1344 = vmatpush2.msra.mxu0 %v97
  %1345 = vmatprep.subr.mxu0 %v96
  %1346 = vmatpush2.msra.mxu0 %v95
  %1347 = vmatprep.subr.mxu0 %v94
  %1348 = vmatpush2.msra.mxu0 %v93
  %1349 = vmatprep.subr.mxu0 %v92
  %1350 = vmatpush2.msra.mxu0 %v91
  %1351 = vmatprep.subr.mxu0 %v90
  %1352 = vmatpush2.msra.mxu0 %v89
  %1353 = vmatprep.subr.mxu0 %v88
  %1354 = vmatpush2.msra.mxu0 %v87
  %1355 = vmatprep.subr.mxu0 %v86
  %1356 = vmatpush2.msra.mxu0 %v85
  %1357 = vmatprep.subr.mxu0 %v84
  %1358 = vmatpush2.msra.mxu0 %v83
  %1359 = vmatprep.subr.mxu0 %v82
  %1360 = vmatpush2.msra.mxu0 %v81
  %1361 = vmatprep.subr.mxu0 %v80
  %1362 = vmatpush2.msra.mxu0 %v79
  %1363 = vmatprep.subr.mxu0 %v78
  %1364 = vmatpush2.msra.mxu0 %v77
  %1365 = vmatprep.subr.mxu0 %v76
  %1366 = vmatpush2.msra.mxu0 %v75
  %1367 = vmatprep.mubr.f32.mxu0 %v1294
  %1368 = vmatmul.mubr.f32.gmra.mxu0 %v1293
  %v1369 = vpop.f32.mrf.mxu0
  %v1370 = vadd.f32 0.0, %v1369
  %v1371 = vpop.f32.mrf.mxu0
  %v1372 = vadd.f32 0.0, %v1371
  %1373 = vdwg.mxu0
  %1374 = vmatprep.subr.mxu0 %v138
  %1375 = vmatpush1.msra.mxu0 %v137
  %1376 = vmatprep.subr.mxu0 %v136
  %1377 = vmatpush1.msra.mxu0 %v135
  %1378 = vmatprep.subr.mxu0 %v134
  %1379 = vmatpush1.msra.mxu0 %v133
  %1380 = vmatprep.subr.mxu0 %v132
  %1381 = vmatpush1.msra.mxu0 %v131
  %1382 = vmatprep.subr.mxu0 %v130
  %1383 = vmatpush1.msra.mxu0 %v129
  %1384 = vmatprep.subr.mxu0 %v128
  %1385 = vmatpush1.msra.mxu0 %v127
  %1386 = vmatprep.subr.mxu0 %v126
  %1387 = vmatpush1.msra.mxu0 %v125
  %1388 = vmatprep.subr.mxu0 %v124
  %1389 = vmatpush1.msra.mxu0 %v123
  %1390 = vmatprep.subr.mxu0 %v122
  %1391 = vmatpush1.msra.mxu0 %v121
  %1392 = vmatprep.subr.mxu0 %v120
  %1393 = vmatpush1.msra.mxu0 %v119
  %1394 = vmatprep.subr.mxu0 %v118
  %1395 = vmatpush1.msra.mxu0 %v117
  %1396 = vmatprep.subr.mxu0 %v116
  %1397 = vmatpush1.msra.mxu0 %v115
  %1398 = vmatprep.subr.mxu0 %v114
  %1399 = vmatpush1.msra.mxu0 %v113
  %1400 = vmatprep.subr.mxu0 %v112
  %1401 = vmatpush1.msra.mxu0 %v111
  %1402 = vmatprep.subr.mxu0 %v110
  %1403 = vmatpush1.msra.mxu0 %v109
  %1404 = vmatprep.subr.mxu0 %v108
  %1405 = vmatpush1.msra.mxu0 %v107
  %1406 = vmatprep.subr.mxu0 %v170
  %1407 = vmatpush2.msra.mxu0 %v169
  %1408 = vmatprep.subr.mxu0 %v168
  %1409 = vmatpush2.msra.mxu0 %v167
  %1410 = vmatprep.subr.mxu0 %v166
  %1411 = vmatpush2.msra.mxu0 %v165
  %1412 = vmatprep.subr.mxu0 %v164
  %1413 = vmatpush2.msra.mxu0 %v163
  %1414 = vmatprep.subr.mxu0 %v162
  %1415 = vmatpush2.msra.mxu0 %v161
  %1416 = vmatprep.subr.mxu0 %v160
  %1417 = vmatpush2.msra.mxu0 %v159
  %1418 = vmatprep.subr.mxu0 %v158
  %1419 = vmatpush2.msra.mxu0 %v157
  %1420 = vmatprep.subr.mxu0 %v156
  %1421 = vmatpush2.msra.mxu0 %v155
  %1422 = vmatprep.subr.mxu0 %v154
  %1423 = vmatpush2.msra.mxu0 %v153
  %1424 = vmatprep.subr.mxu0 %v152
  %1425 = vmatpush2.msra.mxu0 %v151
  %1426 = vmatprep.subr.mxu0 %v150
  %1427 = vmatpush2.msra.mxu0 %v149
  %1428 = vmatprep.subr.mxu0 %v148
  %1429 = vmatpush2.msra.mxu0 %v147
  %1430 = vmatprep.subr.mxu0 %v146
  %1431 = vmatpush2.msra.mxu0 %v145
  %1432 = vmatprep.subr.mxu0 %v144
  %1433 = vmatpush2.msra.mxu0 %v143
  %1434 = vmatprep.subr.mxu0 %v142
  %1435 = vmatpush2.msra.mxu0 %v141
  %1436 = vmatprep.subr.mxu0 %v140
  %1437 = vmatpush2.msra.mxu0 %v139
  %1438 = vmatprep.mubr.f32.mxu0 %v1296
  %1439 = vmatmul.mubr.f32.gmra.mxu0 %v1295
  %v1440 = vpop.f32.mrf.mxu0
  %v1441 = vadd.f32 %v1370, %v1440
  %v1442 = vpop.f32.mrf.mxu0
  %v1443 = vadd.f32 %v1372, %v1442
  %1444 = vdwg.mxu0
  %1445 = vmatprep.subr.mxu0 %v202
  %1446 = vmatpush1.msra.mxu0 %v201
  %1447 = vmatprep.subr.mxu0 %v200
  %1448 = vmatpush1.msra.mxu0 %v199
  %1449 = vmatprep.subr.mxu0 %v198
  %1450 = vmatpush1.msra.mxu0 %v197
  %1451 = vmatprep.subr.mxu0 %v196
  %1452 = vmatpush1.msra.mxu0 %v195
  %1453 = vmatprep.subr.mxu0 %v194
  %1454 = vmatpush1.msra.mxu0 %v193
  %1455 = vmatprep.subr.mxu0 %v192
  %1456 = vmatpush1.msra.mxu0 %v191
  %1457 = vmatprep.subr.mxu0 %v190
  %1458 = vmatpush1.msra.mxu0 %v189
  %1459 = vmatprep.subr.mxu0 %v188
  %1460 = vmatpush1.msra.mxu0 %v187
  %1461 = vmatprep.subr.mxu0 %v186
  %1462 = vmatpush1.msra.mxu0 %v185
  %1463 = vmatprep.subr.mxu0 %v184
  %1464 = vmatpush1.msra.mxu0 %v183
  %1465 = vmatprep.subr.mxu0 %v182
  %1466 = vmatpush1.msra.mxu0 %v181
  %1467 = vmatprep.subr.mxu0 %v180
  %1468 = vmatpush1.msra.mxu0 %v179
  %1469 = vmatprep.subr.mxu0 %v178
  %1470 = vmatpush1.msra.mxu0 %v177
  %1471 = vmatprep.subr.mxu0 %v176
  %1472 = vmatpush1.msra.mxu0 %v175
  %1473 = vmatprep.subr.mxu0 %v174
  %1474 = vmatpush1.msra.mxu0 %v173
  %1475 = vmatprep.subr.mxu0 %v172
  %1476 = vmatpush1.msra.mxu0 %v171
  %1477 = vmatprep.subr.mxu0 %v234
  %1478 = vmatpush2.msra.mxu0 %v233
  %1479 = vmatprep.subr.mxu0 %v232
  %1480 = vmatpush2.msra.mxu0 %v231
  %1481 = vmatprep.subr.mxu0 %v230
  %1482 = vmatpush2.msra.mxu0 %v229
  %1483 = vmatprep.subr.mxu0 %v228
  %1484 = vmatpush2.msra.mxu0 %v227
  %1485 = vmatprep.subr.mxu0 %v226
  %1486 = vmatpush2.msra.mxu0 %v225
  %1487 = vmatprep.subr.mxu0 %v224
  %1488 = vmatpush2.msra.mxu0 %v223
  %1489 = vmatprep.subr.mxu0 %v222
  %1490 = vmatpush2.msra.mxu0 %v221
  %1491 = vmatprep.subr.mxu0 %v220
  %1492 = vmatpush2.msra.mxu0 %v219
  %1493 = vmatprep.subr.mxu0 %v218
  %1494 = vmatpush2.msra.mxu0 %v217
  %1495 = vmatprep.subr.mxu0 %v216
  %1496 = vmatpush2.msra.mxu0 %v215
  %1497 = vmatprep.subr.mxu0 %v214
  %1498 = vmatpush2.msra.mxu0 %v213
  %1499 = vmatprep.subr.mxu0 %v212
  %1500 = vmatpush2.msra.mxu0 %v211
  %1501 = vmatprep.subr.mxu0 %v210
  %1502 = vmatpush2.msra.mxu0 %v209
  %1503 = vmatprep.subr.mxu0 %v208
  %1504 = vmatpush2.msra.mxu0 %v207
  %1505 = vmatprep.subr.mxu0 %v206
  %1506 = vmatpush2.msra.mxu0 %v205
  %1507 = vmatprep.subr.mxu0 %v204
  %1508 = vmatpush2.msra.mxu0 %v203
  %1509 = vmatprep.mubr.f32.mxu0 %v1298
  %1510 = vmatmul.mubr.f32.gmra.mxu0 %v1297
  %v1511 = vpop.f32.mrf.mxu0
  %v1512 = vadd.f32 %v1441, %v1511
  %v1513 = vpop.f32.mrf.mxu0
  %v1514 = vadd.f32 %v1443, %v1513
  %1515 = vdwg.mxu0
  %1516 = vmatprep.subr.mxu0 0.0
  %1517 = vmatpush1.msra.mxu0 0.0
  %1518 = vmatprep.subr.mxu0 0.0
  %1519 = vmatpush1.msra.mxu0 0.0
  %1520 = vmatprep.subr.mxu0 0.0
  %1521 = vmatpush1.msra.mxu0 0.0
  %1522 = vmatprep.subr.mxu0 0.0
  %1523 = vmatpush1.msra.mxu0 0.0
  %1524 = vmatprep.subr.mxu0 0.0
  %1525 = vmatpush1.msra.mxu0 0.0
  %1526 = vmatprep.subr.mxu0 0.0
  %1527 = vmatpush1.msra.mxu0 0.0
  %1528 = vmatprep.subr.mxu0 0.0
  %1529 = vmatpush1.msra.mxu0 0.0
  %1530 = vmatprep.subr.mxu0 0.0
  %1531 = vmatpush1.msra.mxu0 0.0
  %1532 = vmatprep.subr.mxu0 0.0
  %1533 = vmatpush1.msra.mxu0 0.0
  %1534 = vmatprep.subr.mxu0 0.0
  %1535 = vmatpush1.msra.mxu0 0.0
  %1536 = vmatprep.subr.mxu0 0.0
  %1537 = vmatpush1.msra.mxu0 0.0
  %1538 = vmatprep.subr.mxu0 0.0
  %1539 = vmatpush1.msra.mxu0 0.0
  %1540 = vmatprep.subr.mxu0 0.0
  %1541 = vmatpush1.msra.mxu0 0.0
  %1542 = vmatprep.subr.mxu0 0.0
  %1543 = vmatpush1.msra.mxu0 0.0
  %1544 = vmatprep.subr.mxu0 %v238
  %1545 = vmatpush1.msra.mxu0 %v237
  %1546 = vmatprep.subr.mxu0 %v236
  %1547 = vmatpush1.msra.mxu0 %v235
  %1548 = vmatprep.subr.mxu0 0.0
  %1549 = vmatpush2.msra.mxu0 0.0
  %1550 = vmatprep.subr.mxu0 0.0
  %1551 = vmatpush2.msra.mxu0 0.0
  %1552 = vmatprep.subr.mxu0 0.0
  %1553 = vmatpush2.msra.mxu0 0.0
  %1554 = vmatprep.subr.mxu0 0.0
  %1555 = vmatpush2.msra.mxu0 0.0
  %1556 = vmatprep.subr.mxu0 0.0
  %1557 = vmatpush2.msra.mxu0 0.0
  %1558 = vmatprep.subr.mxu0 0.0
  %1559 = vmatpush2.msra.mxu0 0.0
  %1560 = vmatprep.subr.mxu0 0.0
  %1561 = vmatpush2.msra.mxu0 0.0
  %1562 = vmatprep.subr.mxu0 0.0
  %1563 = vmatpush2.msra.mxu0 0.0
  %1564 = vmatprep.subr.mxu0 0.0
  %1565 = vmatpush2.msra.mxu0 0.0
  %1566 = vmatprep.subr.mxu0 0.0
  %1567 = vmatpush2.msra.mxu0 0.0
  %1568 = vmatprep.subr.mxu0 0.0
  %1569 = vmatpush2.msra.mxu0 0.0
  %1570 = vmatprep.subr.mxu0 0.0
  %1571 = vmatpush2.msra.mxu0 0.0
  %1572 = vmatprep.subr.mxu0 0.0
  %1573 = vmatpush2.msra.mxu0 0.0
  %1574 = vmatprep.subr.mxu0 0.0
  %1575 = vmatpush2.msra.mxu0 0.0
  %1576 = vmatprep.subr.mxu0 0.0
  %1577 = vmatpush2.msra.mxu0 0.0
  %1578 = vmatprep.subr.mxu0 0.0
  %1579 = vmatpush2.msra.mxu0 0.0
  %1580 = vmatprep.mubr.f32.mxu0 0.0
  %1581 = vmatmul.mubr.f32.gmra.mxu0 %v1301
  %v1582 = vpop.f32.mrf.mxu0
  %v1583 = vadd.f32 %v1512, %v1582
  %v1584 = vpop.f32.mrf.mxu0
  %v1585 = vadd.f32 %v1514, %v1584
  %1586 = vdwg.mxu0
  %s1587 = scalar_lea.vmem %s0, 1120
  %v1588 = vld [vmem:[%s1587] sm:$0xff]
  %v1589 = vld [vmem:[%s1587 + $0x8] sm:$0xff]
  %v1590 = vld [vmem:[%s1587 + $0x10] sm:$0xff]
  %v1591 = vld [vmem:[%s1587 + $0x18] sm:$0xff]
  %v1592 = vld [vmem:[%s1587 + $0x20] sm:$0xff]
  %v1593 = vld [vmem:[%s1587 + $0x28] sm:$0xff]
  %v1594 = vld [vmem:[%s1587 + $0x30] sm:$0xff]
  %v1595 = vld [vmem:[%s1587 + $0x38] sm:$0xff]
  %v1596 = vld [vmem:[%s1587 + $0x40] sm:$0xff]
  %v1597 = vld [vmem:[%s1587 + $0x48] sm:$0xff]
  %v1598 = vld [vmem:[%s1587 + $0x50] sm:$0xff]
  %v1599 = vld [vmem:[%s1587 + $0x58] sm:$0xff]
  %v1600 = vld [vmem:[%s1587 + $0x60] sm:$0xff]
  %v1601 = vld [vmem:[%s1587 + $0x68] sm:$0xff]
  %v1602 = vld [vmem:[%s1587 + $0x70] sm:$0xff]
  %v1603 = vld [vmem:[%s1587 + $0x78] sm:$0xff]
  %v1604 = vld [vmem:[%s1587 + $0x80] sm:$0xff]
  %v1605 = vld [vmem:[%s1587 + $0x88] sm:$0xff]
  %v1606 = vld [vmem:[%s1587 + $0x90] sm:$0xff]
  %v1607 = vld [vmem:[%s1587 + $0x98] sm:$0xff]
  %v1608 = vld [vmem:[%s1587 + $0xa0] sm:$0xff]
  %v1609 = vld [vmem:[%s1587 + $0xa8] sm:$0xff]
  %v1610 = vld [vmem:[%s1587 + $0xb0] sm:$0xff]
  %v1611 = vld [vmem:[%s1587 + $0xb8] sm:$0xff]
  %v1612 = vld [vmem:[%s1587 + $0xc0] sm:$0xff]
  %v1613 = vld [vmem:[%s1587 + $0xc8] sm:$0xff]
  %v1614 = vld [vmem:[%s1587 + $0xd0] sm:$0xff]
  %v1615 = vld [vmem:[%s1587 + $0xd8] sm:$0xff]
  %v1616 = vld [vmem:[%s1587 + $0xe0] sm:$0xff]
  %v1617 = vld [vmem:[%s1587 + $0xe8] sm:$0xff]
  %v1618 = vld [vmem:[%s1587 + $0xf0] sm:$0xff]
  %v1619 = vld [vmem:[%s1587 + $0xf8] sm:$0xff]
  %v1620 = vld [vmem:[%s1587 + $0x100] sm:$0xff]
  %v1621 = vld [vmem:[%s1587 + $0x108] sm:$0xff]
  %v1622 = vld [vmem:[%s1587 + $0x110] sm:$0xff]
  %v1623 = vld [vmem:[%s1587 + $0x118] sm:$0xff]
  %v1624 = vld [vmem:[%s1587 + $0x120] sm:$0xff]
  %v1625 = vld [vmem:[%s1587 + $0x128] sm:$0xff]
  %v1626 = vld [vmem:[%s1587 + $0x130] sm:$0xff]
  %v1627 = vld [vmem:[%s1587 + $0x138] sm:$0xff]
  %v1628 = vld [vmem:[%s1587 + $0x140] sm:$0xff]
  %v1629 = vld [vmem:[%s1587 + $0x148] sm:$0xff]
  %v1630 = vld [vmem:[%s1587 + $0x150] sm:$0xff]
  %v1631 = vld [vmem:[%s1587 + $0x158] sm:$0xff]
  %v1632 = vld [vmem:[%s1587 + $0x160] sm:$0xff]
  %v1633 = vld [vmem:[%s1587 + $0x168] sm:$0xff]
  %v1634 = vld [vmem:[%s1587 + $0x170] sm:$0xff]
  %v1635 = vld [vmem:[%s1587 + $0x178] sm:$0xff]
  %v1636 = vld [vmem:[%s1587 + $0x180] sm:$0xff]
  %v1637 = vld [vmem:[%s1587 + $0x188] sm:$0xff]
  %v1638 = vld [vmem:[%s1587 + $0x190] sm:$0xff]
  %v1639 = vld [vmem:[%s1587 + $0x198] sm:$0xff]
  %v1640 = vld [vmem:[%s1587 + $0x1a0] sm:$0xff]
  %v1641 = vld [vmem:[%s1587 + $0x1a8] sm:$0xff]
  %v1642 = vld [vmem:[%s1587 + $0x1b0] sm:$0xff]
  %v1643 = vld [vmem:[%s1587 + $0x1b8] sm:$0xff]
  %v1644 = vld [vmem:[%s1587 + $0x1c0] sm:$0xff]
  %v1645 = vld [vmem:[%s1587 + $0x1c8] sm:$0xff]
  %v1646 = vld [vmem:[%s1587 + $0x1d0] sm:$0xff]
  %v1647 = vld [vmem:[%s1587 + $0x1d8] sm:$0xff]
  %v1648 = vld [vmem:[%s1587 + $0x1e0] sm:$0xff]
  %v1649 = vld [vmem:[%s1587 + $0x1e8] sm:$0xff]
  %v1650 = vld [vmem:[%s1587 + $0x1f0] sm:$0xff]
  %v1651 = vld [vmem:[%s1587 + $0x1f8] sm:$0x7]
  %v1652 = vld [vmem:[%s1587 + $0x200] sm:$0x7]
  %v1653 = vld [vmem:[%s1587 + $0x208] sm:$0x7]
  %v1654 = vld [vmem:[%s1587 + $0x210] sm:$0x7]
  %v1655 = vld [vmem:[%s1587 + $0x218] sm:$0x7]
  %v1656 = vld [vmem:[%s1587 + $0x220] sm:$0x7]
  %v1657 = vld [vmem:[%s1587 + $0x228] sm:$0x7]
  %v1659 = vsel %vm318, %v1651, 0
  %v1662 = vsel %vm318, %v1652, 0
  %v1665 = vsel %vm318, %v1653, 0
  %v1668 = vsel %vm318, %v1654, 0
  %v1671 = vsel %vm318, %v1655, 0
  %v1674 = vsel %vm318, %v1656, 0
  %v1677 = vsel %vm318, %v1657, 0
  %1679 = vmatprep.subr.mxu0 0.0
  %1680 = vmatpush1.msra.mxu0 0.0
  %1681 = vmatprep.subr.mxu0 0.0
  %1682 = vmatpush1.msra.mxu0 0.0
  %1683 = vmatprep.subr.mxu0 0.0
  %1684 = vmatpush1.msra.mxu0 0.0
  %1685 = vmatprep.subr.mxu0 0.0
  %1686 = vmatpush1.msra.mxu0 0.0
  %1687 = vmatprep.subr.mxu0 0.0
  %1688 = vmatpush1.msra.mxu0 0.0
  %1689 = vmatprep.subr.mxu0 0.0
  %1690 = vmatpush1.msra.mxu0 0.0
  %1691 = vmatprep.subr.mxu0 %v1662
  %1692 = vmatpush1.msra.mxu0 %v1659
  %1693 = vmatprep.subr.mxu0 %v1645
  %1694 = vmatpush1.msra.mxu0 %v1644
  %1695 = vmatprep.subr.mxu0 %v1638
  %1696 = vmatpush1.msra.mxu0 %v1637
  %1697 = vmatprep.subr.mxu0 %v1631
  %1698 = vmatpush1.msra.mxu0 %v1630
  %1699 = vmatprep.subr.mxu0 %v1624
  %1700 = vmatpush1.msra.mxu0 %v1623
  %1701 = vmatprep.subr.mxu0 %v1617
  %1702 = vmatpush1.msra.mxu0 %v1616
  %1703 = vmatprep.subr.mxu0 %v1610
  %1704 = vmatpush1.msra.mxu0 %v1609
  %1705 = vmatprep.subr.mxu0 %v1603
  %1706 = vmatpush1.msra.mxu0 %v1602
  %1707 = vmatprep.subr.mxu0 %v1596
  %1708 = vmatpush1.msra.mxu0 %v1595
  %1709 = vmatprep.subr.mxu0 %v1589
  %1710 = vmatpush1.msra.mxu0 %v1588
  %1711 = vmatprep.subr.mxu0 0.0
  %1712 = vmatpush2.msra.mxu0 0.0
  %1713 = vmatprep.subr.mxu0 0.0
  %1714 = vmatpush2.msra.mxu0 0.0
  %1715 = vmatprep.subr.mxu0 0.0
  %1716 = vmatpush2.msra.mxu0 0.0
  %1717 = vmatprep.subr.mxu0 0.0
  %1718 = vmatpush2.msra.mxu0 0.0
  %1719 = vmatprep.subr.mxu0 0.0
  %1720 = vmatpush2.msra.mxu0 0.0
  %1721 = vmatprep.subr.mxu0 0.0
  %1722 = vmatpush2.msra.mxu0 0.0
  %1723 = vmatprep.subr.mxu0 0.0
  %1724 = vmatpush2.msra.mxu0 0.0
  %1725 = vmatprep.subr.mxu0 0.0
  %1726 = vmatpush2.msra.mxu0 0.0
  %1727 = vmatprep.subr.mxu0 0.0
  %1728 = vmatpush2.msra.mxu0 0.0
  %1729 = vmatprep.subr.mxu0 0.0
  %1730 = vmatpush2.msra.mxu0 0.0
  %1731 = vmatprep.subr.mxu0 0.0
  %1732 = vmatpush2.msra.mxu0 0.0
  %1733 = vmatprep.subr.mxu0 0.0
  %1734 = vmatpush2.msra.mxu0 0.0
  %1735 = vmatprep.subr.mxu0 0.0
  %1736 = vmatpush2.msra.mxu0 0.0
  %1737 = vmatprep.subr.mxu0 0.0
  %1738 = vmatpush2.msra.mxu0 0.0
  %1739 = vmatprep.subr.mxu0 0.0
  %1740 = vmatpush2.msra.mxu0 0.0
  %1741 = vmatprep.subr.mxu0 0.0
  %1742 = vmatpush2.msra.mxu0 0.0
  %1743 = vmatprep.mubr.f32.mxu0 0.0
  %1744 = vmatmul.mubr.f32.gmra.mxu0 %v316
  %v1745 = vpop.f32.mrf.mxu0
  %v1746 = vadd.f32 %v312, %v1745
  %v1747 = vpop.f32.mrf.mxu0
  %v1748 = vadd.f32 %v312, %v1747
  %1749 = vdwg.mxu0
  %1750 = vmatprep.subr.mxu0 0.0
  %1751 = vmatpush1.msra.mxu0 0.0
  %1752 = vmatprep.subr.mxu0 0.0
  %1753 = vmatpush1.msra.mxu0 0.0
  %1754 = vmatprep.subr.mxu0 0.0
  %1755 = vmatpush1.msra.mxu0 0.0
  %1756 = vmatprep.subr.mxu0 0.0
  %1757 = vmatpush1.msra.mxu0 0.0
  %1758 = vmatprep.subr.mxu0 0.0
  %1759 = vmatpush1.msra.mxu0 0.0
  %1760 = vmatprep.subr.mxu0 0.0
  %1761 = vmatpush1.msra.mxu0 0.0
  %1762 = vmatprep.subr.mxu0 %v1668
  %1763 = vmatpush1.msra.mxu0 %v1665
  %1764 = vmatprep.subr.mxu0 %v1647
  %1765 = vmatpush1.msra.mxu0 %v1646
  %1766 = vmatprep.subr.mxu0 %v1640
  %1767 = vmatpush1.msra.mxu0 %v1639
  %1768 = vmatprep.subr.mxu0 %v1633
  %1769 = vmatpush1.msra.mxu0 %v1632
  %1770 = vmatprep.subr.mxu0 %v1626
  %1771 = vmatpush1.msra.mxu0 %v1625
  %1772 = vmatprep.subr.mxu0 %v1619
  %1773 = vmatpush1.msra.mxu0 %v1618
  %1774 = vmatprep.subr.mxu0 %v1612
  %1775 = vmatpush1.msra.mxu0 %v1611
  %1776 = vmatprep.subr.mxu0 %v1605
  %1777 = vmatpush1.msra.mxu0 %v1604
  %1778 = vmatprep.subr.mxu0 %v1598
  %1779 = vmatpush1.msra.mxu0 %v1597
  %1780 = vmatprep.subr.mxu0 %v1591
  %1781 = vmatpush1.msra.mxu0 %v1590
  %1782 = vmatprep.subr.mxu0 0.0
  %1783 = vmatpush2.msra.mxu0 0.0
  %1784 = vmatprep.subr.mxu0 0.0
  %1785 = vmatpush2.msra.mxu0 0.0
  %1786 = vmatprep.subr.mxu0 0.0
  %1787 = vmatpush2.msra.mxu0 0.0
  %1788 = vmatprep.subr.mxu0 0.0
  %1789 = vmatpush2.msra.mxu0 0.0
  %1790 = vmatprep.subr.mxu0 0.0
  %1791 = vmatpush2.msra.mxu0 0.0
  %1792 = vmatprep.subr.mxu0 0.0
  %1793 = vmatpush2.msra.mxu0 0.0
  %1794 = vmatprep.subr.mxu0 0.0
  %1795 = vmatpush2.msra.mxu0 0.0
  %1796 = vmatprep.subr.mxu0 0.0
  %1797 = vmatpush2.msra.mxu0 0.0
  %1798 = vmatprep.subr.mxu0 0.0
  %1799 = vmatpush2.msra.mxu0 0.0
  %1800 = vmatprep.subr.mxu0 0.0
  %1801 = vmatpush2.msra.mxu0 0.0
  %1802 = vmatprep.subr.mxu0 0.0
  %1803 = vmatpush2.msra.mxu0 0.0
  %1804 = vmatprep.subr.mxu0 0.0
  %1805 = vmatpush2.msra.mxu0 0.0
  %1806 = vmatprep.subr.mxu0 0.0
  %1807 = vmatpush2.msra.mxu0 0.0
  %1808 = vmatprep.subr.mxu0 0.0
  %1809 = vmatpush2.msra.mxu0 0.0
  %1810 = vmatprep.subr.mxu0 0.0
  %1811 = vmatpush2.msra.mxu0 0.0
  %1812 = vmatprep.subr.mxu0 0.0
  %1813 = vmatpush2.msra.mxu0 0.0
  %1814 = vmatprep.mubr.f32.mxu0 0.0
  %1815 = vmatmul.mubr.f32.gmra.mxu0 %v316
  %v1816 = vpop.f32.mrf.mxu0
  %v1817 = vadd.f32 %v312, %v1816
  %v1818 = vpop.f32.mrf.mxu0
  %v1819 = vadd.f32 %v312, %v1818
  %1820 = vdwg.mxu0
  %1821 = vmatprep.subr.mxu0 0.0
  %1822 = vmatpush1.msra.mxu0 0.0
  %1823 = vmatprep.subr.mxu0 0.0
  %1824 = vmatpush1.msra.mxu0 0.0
  %1825 = vmatprep.subr.mxu0 0.0
  %1826 = vmatpush1.msra.mxu0 0.0
  %1827 = vmatprep.subr.mxu0 0.0
  %1828 = vmatpush1.msra.mxu0 0.0
  %1829 = vmatprep.subr.mxu0 0.0
  %1830 = vmatpush1.msra.mxu0 0.0
  %1831 = vmatprep.subr.mxu0 0.0
  %1832 = vmatpush1.msra.mxu0 0.0
  %1833 = vmatprep.subr.mxu0 %v1674
  %1834 = vmatpush1.msra.mxu0 %v1671
  %1835 = vmatprep.subr.mxu0 %v1649
  %1836 = vmatpush1.msra.mxu0 %v1648
  %1837 = vmatprep.subr.mxu0 %v1642
  %1838 = vmatpush1.msra.mxu0 %v1641
  %1839 = vmatprep.subr.mxu0 %v1635
  %1840 = vmatpush1.msra.mxu0 %v1634
  %1841 = vmatprep.subr.mxu0 %v1628
  %1842 = vmatpush1.msra.mxu0 %v1627
  %1843 = vmatprep.subr.mxu0 %v1621
  %1844 = vmatpush1.msra.mxu0 %v1620
  %1845 = vmatprep.subr.mxu0 %v1614
  %1846 = vmatpush1.msra.mxu0 %v1613
  %1847 = vmatprep.subr.mxu0 %v1607
  %1848 = vmatpush1.msra.mxu0 %v1606
  %1849 = vmatprep.subr.mxu0 %v1600
  %1850 = vmatpush1.msra.mxu0 %v1599
  %1851 = vmatprep.subr.mxu0 %v1593
  %1852 = vmatpush1.msra.mxu0 %v1592
  %1853 = vmatprep.subr.mxu0 0.0
  %1854 = vmatpush2.msra.mxu0 0.0
  %1855 = vmatprep.subr.mxu0 0.0
  %1856 = vmatpush2.msra.mxu0 0.0
  %1857 = vmatprep.subr.mxu0 0.0
  %1858 = vmatpush2.msra.mxu0 0.0
  %1859 = vmatprep.subr.mxu0 0.0
  %1860 = vmatpush2.msra.mxu0 0.0
  %1861 = vmatprep.subr.mxu0 0.0
  %1862 = vmatpush2.msra.mxu0 0.0
  %1863 = vmatprep.subr.mxu0 0.0
  %1864 = vmatpush2.msra.mxu0 0.0
  %1865 = vmatprep.subr.mxu0 0.0
  %1866 = vmatpush2.msra.mxu0 0.0
  %1867 = vmatprep.subr.mxu0 0.0
  %1868 = vmatpush2.msra.mxu0 0.0
  %1869 = vmatprep.subr.mxu0 0.0
  %1870 = vmatpush2.msra.mxu0 0.0
  %1871 = vmatprep.subr.mxu0 0.0
  %1872 = vmatpush2.msra.mxu0 0.0
  %1873 = vmatprep.subr.mxu0 0.0
  %1874 = vmatpush2.msra.mxu0 0.0
  %1875 = vmatprep.subr.mxu0 0.0
  %1876 = vmatpush2.msra.mxu0 0.0
  %1877 = vmatprep.subr.mxu0 0.0
  %1878 = vmatpush2.msra.mxu0 0.0
  %1879 = vmatprep.subr.mxu0 0.0
  %1880 = vmatpush2.msra.mxu0 0.0
  %1881 = vmatprep.subr.mxu0 0.0
  %1882 = vmatpush2.msra.mxu0 0.0
  %1883 = vmatprep.subr.mxu0 0.0
  %1884 = vmatpush2.msra.mxu0 0.0
  %1885 = vmatprep.mubr.f32.mxu0 0.0
  %1886 = vmatmul.mubr.f32.gmra.mxu0 %v316
  %v1887 = vpop.f32.mrf.mxu0
  %v1888 = vadd.f32 %v312, %v1887
  %v1889 = vpop.f32.mrf.mxu0
  %v1890 = vadd.f32 %v312, %v1889
  %1891 = vdwg.mxu0
  %1892 = vmatprep.subr.mxu0 0.0
  %1893 = vmatpush1.msra.mxu0 0.0
  %1894 = vmatprep.subr.mxu0 0.0
  %1895 = vmatpush1.msra.mxu0 0.0
  %1896 = vmatprep.subr.mxu0 0.0
  %1897 = vmatpush1.msra.mxu0 0.0
  %1898 = vmatprep.subr.mxu0 0.0
  %1899 = vmatpush1.msra.mxu0 0.0
  %1900 = vmatprep.subr.mxu0 0.0
  %1901 = vmatpush1.msra.mxu0 0.0
  %1902 = vmatprep.subr.mxu0 0.0
  %1903 = vmatpush1.msra.mxu0 0.0
  %1904 = vmatprep.subr.mxu0 0.0
  %1905 = vmatpush1.msra.mxu0 %v1677
  %1906 = vmatprep.subr.mxu0 0.0
  %1907 = vmatpush1.msra.mxu0 %v1650
  %1908 = vmatprep.subr.mxu0 0.0
  %1909 = vmatpush1.msra.mxu0 %v1643
  %1910 = vmatprep.subr.mxu0 0.0
  %1911 = vmatpush1.msra.mxu0 %v1636
  %1912 = vmatprep.subr.mxu0 0.0
  %1913 = vmatpush1.msra.mxu0 %v1629
  %1914 = vmatprep.subr.mxu0 0.0
  %1915 = vmatpush1.msra.mxu0 %v1622
  %1916 = vmatprep.subr.mxu0 0.0
  %1917 = vmatpush1.msra.mxu0 %v1615
  %1918 = vmatprep.subr.mxu0 0.0
  %1919 = vmatpush1.msra.mxu0 %v1608
  %1920 = vmatprep.subr.mxu0 0.0
  %1921 = vmatpush1.msra.mxu0 %v1601
  %1922 = vmatprep.subr.mxu0 0.0
  %1923 = vmatpush1.msra.mxu0 %v1594
  %1924 = vmatprep.subr.mxu0 0.0
  %1925 = vmatpush2.msra.mxu0 0.0
  %1926 = vmatprep.subr.mxu0 0.0
  %1927 = vmatpush2.msra.mxu0 0.0
  %1928 = vmatprep.subr.mxu0 0.0
  %1929 = vmatpush2.msra.mxu0 0.0
  %1930 = vmatprep.subr.mxu0 0.0
  %1931 = vmatpush2.msra.mxu0 0.0
  %1932 = vmatprep.subr.mxu0 0.0
  %1933 = vmatpush2.msra.mxu0 0.0
  %1934 = vmatprep.subr.mxu0 0.0
  %1935 = vmatpush2.msra.mxu0 0.0
  %1936 = vmatprep.subr.mxu0 0.0
  %1937 = vmatpush2.msra.mxu0 0.0
  %1938 = vmatprep.subr.mxu0 0.0
  %1939 = vmatpush2.msra.mxu0 0.0
  %1940 = vmatprep.subr.mxu0 0.0
  %1941 = vmatpush2.msra.mxu0 0.0
  %1942 = vmatprep.subr.mxu0 0.0
  %1943 = vmatpush2.msra.mxu0 0.0
  %1944 = vmatprep.subr.mxu0 0.0
  %1945 = vmatpush2.msra.mxu0 0.0
  %1946 = vmatprep.subr.mxu0 0.0
  %1947 = vmatpush2.msra.mxu0 0.0
  %1948 = vmatprep.subr.mxu0 0.0
  %1949 = vmatpush2.msra.mxu0 0.0
  %1950 = vmatprep.subr.mxu0 0.0
  %1951 = vmatpush2.msra.mxu0 0.0
  %1952 = vmatprep.subr.mxu0 0.0
  %1953 = vmatpush2.msra.mxu0 0.0
  %1954 = vmatprep.subr.mxu0 0.0
  %1955 = vmatpush2.msra.mxu0 0.0
  %1956 = vmatprep.mubr.f32.mxu0 0.0
  %1957 = vmatmul.mubr.f32.gmra.mxu0 %v316
  %v1958 = vpop.f32.mrf.mxu0
  %v1959 = vadd.f32 %v312, %v1958
  %v1960 = vpop.f32.mrf.mxu0
  %1961 = vdwg.mxu0
  %v1962 = vtanh.pop %v1746
  %v1963 = vtanh.pop %v1748
  %v1964 = vtanh.pop %v1817
  %v1965 = vtanh.pop %v1819
  %v1966 = vtanh.pop %v1888
  %v1967 = vtanh.pop %v1890
  %v1968 = vtanh.pop %v1959
  %v1970 = vsel %vm630, %v1968, 0
  %1972 = vmatprep.subr.mxu0 %v74
  %1973 = vmatpush1.msra.mxu0 %v73
  %1974 = vmatprep.subr.mxu0 %v72
  %1975 = vmatpush1.msra.mxu0 %v71
  %1976 = vmatprep.subr.mxu0 %v70
  %1977 = vmatpush1.msra.mxu0 %v69
  %1978 = vmatprep.subr.mxu0 %v68
  %1979 = vmatpush1.msra.mxu0 %v67
  %1980 = vmatprep.subr.mxu0 %v66
  %1981 = vmatpush1.msra.mxu0 %v65
  %1982 = vmatprep.subr.mxu0 %v64
  %1983 = vmatpush1.msra.mxu0 %v63
  %1984 = vmatprep.subr.mxu0 %v62
  %1985 = vmatpush1.msra.mxu0 %v61
  %1986 = vmatprep.subr.mxu0 %v60
  %1987 = vmatpush1.msra.mxu0 %v59
  %1988 = vmatprep.subr.mxu0 %v58
  %1989 = vmatpush1.msra.mxu0 %v57
  %1990 = vmatprep.subr.mxu0 %v56
  %1991 = vmatpush1.msra.mxu0 %v55
  %1992 = vmatprep.subr.mxu0 %v54
  %1993 = vmatpush1.msra.mxu0 %v53
  %1994 = vmatprep.subr.mxu0 %v52
  %1995 = vmatpush1.msra.mxu0 %v51
  %1996 = vmatprep.subr.mxu0 %v50
  %1997 = vmatpush1.msra.mxu0 %v49
  %1998 = vmatprep.subr.mxu0 %v48
  %1999 = vmatpush1.msra.mxu0 %v47
  %2000 = vmatprep.subr.mxu0 %v46
  %2001 = vmatpush1.msra.mxu0 %v45
  %2002 = vmatprep.subr.mxu0 %v44
  %2003 = vmatpush1.msra.mxu0 %v43
  %2004 = vmatprep.subr.mxu0 %v106
  %2005 = vmatpush2.msra.mxu0 %v105
  %2006 = vmatprep.subr.mxu0 %v104
  %2007 = vmatpush2.msra.mxu0 %v103
  %2008 = vmatprep.subr.mxu0 %v102
  %2009 = vmatpush2.msra.mxu0 %v101
  %2010 = vmatprep.subr.mxu0 %v100
  %2011 = vmatpush2.msra.mxu0 %v99
  %2012 = vmatprep.subr.mxu0 %v98
  %2013 = vmatpush2.msra.mxu0 %v97
  %2014 = vmatprep.subr.mxu0 %v96
  %2015 = vmatpush2.msra.mxu0 %v95
  %2016 = vmatprep.subr.mxu0 %v94
  %2017 = vmatpush2.msra.mxu0 %v93
  %2018 = vmatprep.subr.mxu0 %v92
  %2019 = vmatpush2.msra.mxu0 %v91
  %2020 = vmatprep.subr.mxu0 %v90
  %2021 = vmatpush2.msra.mxu0 %v89
  %2022 = vmatprep.subr.mxu0 %v88
  %2023 = vmatpush2.msra.mxu0 %v87
  %2024 = vmatprep.subr.mxu0 %v86
  %2025 = vmatpush2.msra.mxu0 %v85
  %2026 = vmatprep.subr.mxu0 %v84
  %2027 = vmatpush2.msra.mxu0 %v83
  %2028 = vmatprep.subr.mxu0 %v82
  %2029 = vmatpush2.msra.mxu0 %v81
  %2030 = vmatprep.subr.mxu0 %v80
  %2031 = vmatpush2.msra.mxu0 %v79
  %2032 = vmatprep.subr.mxu0 %v78
  %2033 = vmatpush2.msra.mxu0 %v77
  %2034 = vmatprep.subr.mxu0 %v76
  %2035 = vmatpush2.msra.mxu0 %v75
  %2036 = vmatprep.mubr.f32.mxu0 %v1963
  %2037 = vmatmul.mubr.f32.gmra.mxu0 %v1962
  %v2038 = vpop.f32.mrf.mxu0
  %v2039 = vadd.f32 0.0, %v2038
  %v2040 = vpop.f32.mrf.mxu0
  %v2041 = vadd.f32 0.0, %v2040
  %2042 = vdwg.mxu0
  %2043 = vmatprep.subr.mxu0 %v138
  %2044 = vmatpush1.msra.mxu0 %v137
  %2045 = vmatprep.subr.mxu0 %v136
  %2046 = vmatpush1.msra.mxu0 %v135
  %2047 = vmatprep.subr.mxu0 %v134
  %2048 = vmatpush1.msra.mxu0 %v133
  %2049 = vmatprep.subr.mxu0 %v132
  %2050 = vmatpush1.msra.mxu0 %v131
  %2051 = vmatprep.subr.mxu0 %v130
  %2052 = vmatpush1.msra.mxu0 %v129
  %2053 = vmatprep.subr.mxu0 %v128
  %2054 = vmatpush1.msra.mxu0 %v127
  %2055 = vmatprep.subr.mxu0 %v126
  %2056 = vmatpush1.msra.mxu0 %v125
  %2057 = vmatprep.subr.mxu0 %v124
  %2058 = vmatpush1.msra.mxu0 %v123
  %2059 = vmatprep.subr.mxu0 %v122
  %2060 = vmatpush1.msra.mxu0 %v121
  %2061 = vmatprep.subr.mxu0 %v120
  %2062 = vmatpush1.msra.mxu0 %v119
  %2063 = vmatprep.subr.mxu0 %v118
  %2064 = vmatpush1.msra.mxu0 %v117
  %2065 = vmatprep.subr.mxu0 %v116
  %2066 = vmatpush1.msra.mxu0 %v115
  %2067 = vmatprep.subr.mxu0 %v114
  %2068 = vmatpush1.msra.mxu0 %v113
  %2069 = vmatprep.subr.mxu0 %v112
  %2070 = vmatpush1.msra.mxu0 %v111
  %2071 = vmatprep.subr.mxu0 %v110
  %2072 = vmatpush1.msra.mxu0 %v109
  %2073 = vmatprep.subr.mxu0 %v108
  %2074 = vmatpush1.msra.mxu0 %v107
  %2075 = vmatprep.subr.mxu0 %v170
  %2076 = vmatpush2.msra.mxu0 %v169
  %2077 = vmatprep.subr.mxu0 %v168
  %2078 = vmatpush2.msra.mxu0 %v167
  %2079 = vmatprep.subr.mxu0 %v166
  %2080 = vmatpush2.msra.mxu0 %v165
  %2081 = vmatprep.subr.mxu0 %v164
  %2082 = vmatpush2.msra.mxu0 %v163
  %2083 = vmatprep.subr.mxu0 %v162
  %2084 = vmatpush2.msra.mxu0 %v161
  %2085 = vmatprep.subr.mxu0 %v160
  %2086 = vmatpush2.msra.mxu0 %v159
  %2087 = vmatprep.subr.mxu0 %v158
  %2088 = vmatpush2.msra.mxu0 %v157
  %2089 = vmatprep.subr.mxu0 %v156
  %2090 = vmatpush2.msra.mxu0 %v155
  %2091 = vmatprep.subr.mxu0 %v154
  %2092 = vmatpush2.msra.mxu0 %v153
  %2093 = vmatprep.subr.mxu0 %v152
  %2094 = vmatpush2.msra.mxu0 %v151
  %2095 = vmatprep.subr.mxu0 %v150
  %2096 = vmatpush2.msra.mxu0 %v149
  %2097 = vmatprep.subr.mxu0 %v148
  %2098 = vmatpush2.msra.mxu0 %v147
  %2099 = vmatprep.subr.mxu0 %v146
  %2100 = vmatpush2.msra.mxu0 %v145
  %2101 = vmatprep.subr.mxu0 %v144
  %2102 = vmatpush2.msra.mxu0 %v143
  %2103 = vmatprep.subr.mxu0 %v142
  %2104 = vmatpush2.msra.mxu0 %v141
  %2105 = vmatprep.subr.mxu0 %v140
  %2106 = vmatpush2.msra.mxu0 %v139
  %2107 = vmatprep.mubr.f32.mxu0 %v1965
  %2108 = vmatmul.mubr.f32.gmra.mxu0 %v1964
  %v2109 = vpop.f32.mrf.mxu0
  %v2110 = vadd.f32 %v2039, %v2109
  %v2111 = vpop.f32.mrf.mxu0
  %v2112 = vadd.f32 %v2041, %v2111
  %2113 = vdwg.mxu0
  %2114 = vmatprep.subr.mxu0 %v202
  %2115 = vmatpush1.msra.mxu0 %v201
  %2116 = vmatprep.subr.mxu0 %v200
  %2117 = vmatpush1.msra.mxu0 %v199
  %2118 = vmatprep.subr.mxu0 %v198
  %2119 = vmatpush1.msra.mxu0 %v197
  %2120 = vmatprep.subr.mxu0 %v196
  %2121 = vmatpush1.msra.mxu0 %v195
  %2122 = vmatprep.subr.mxu0 %v194
  %2123 = vmatpush1.msra.mxu0 %v193
  %2124 = vmatprep.subr.mxu0 %v192
  %2125 = vmatpush1.msra.mxu0 %v191
  %2126 = vmatprep.subr.mxu0 %v190
  %2127 = vmatpush1.msra.mxu0 %v189
  %2128 = vmatprep.subr.mxu0 %v188
  %2129 = vmatpush1.msra.mxu0 %v187
  %2130 = vmatprep.subr.mxu0 %v186
  %2131 = vmatpush1.msra.mxu0 %v185
  %2132 = vmatprep.subr.mxu0 %v184
  %2133 = vmatpush1.msra.mxu0 %v183
  %2134 = vmatprep.subr.mxu0 %v182
  %2135 = vmatpush1.msra.mxu0 %v181
  %2136 = vmatprep.subr.mxu0 %v180
  %2137 = vmatpush1.msra.mxu0 %v179
  %2138 = vmatprep.subr.mxu0 %v178
  %2139 = vmatpush1.msra.mxu0 %v177
  %2140 = vmatprep.subr.mxu0 %v176
  %2141 = vmatpush1.msra.mxu0 %v175
  %2142 = vmatprep.subr.mxu0 %v174
  %2143 = vmatpush1.msra.mxu0 %v173
  %2144 = vmatprep.subr.mxu0 %v172
  %2145 = vmatpush1.msra.mxu0 %v171
  %2146 = vmatprep.subr.mxu0 %v234
  %2147 = vmatpush2.msra.mxu0 %v233
  %2148 = vmatprep.subr.mxu0 %v232
  %2149 = vmatpush2.msra.mxu0 %v231
  %2150 = vmatprep.subr.mxu0 %v230
  %2151 = vmatpush2.msra.mxu0 %v229
  %2152 = vmatprep.subr.mxu0 %v228
  %2153 = vmatpush2.msra.mxu0 %v227
  %2154 = vmatprep.subr.mxu0 %v226
  %2155 = vmatpush2.msra.mxu0 %v225
  %2156 = vmatprep.subr.mxu0 %v224
  %2157 = vmatpush2.msra.mxu0 %v223
  %2158 = vmatprep.subr.mxu0 %v222
  %2159 = vmatpush2.msra.mxu0 %v221
  %2160 = vmatprep.subr.mxu0 %v220
  %2161 = vmatpush2.msra.mxu0 %v219
  %2162 = vmatprep.subr.mxu0 %v218
  %2163 = vmatpush2.msra.mxu0 %v217
  %2164 = vmatprep.subr.mxu0 %v216
  %2165 = vmatpush2.msra.mxu0 %v215
  %2166 = vmatprep.subr.mxu0 %v214
  %2167 = vmatpush2.msra.mxu0 %v213
  %2168 = vmatprep.subr.mxu0 %v212
  %2169 = vmatpush2.msra.mxu0 %v211
  %2170 = vmatprep.subr.mxu0 %v210
  %2171 = vmatpush2.msra.mxu0 %v209
  %2172 = vmatprep.subr.mxu0 %v208
  %2173 = vmatpush2.msra.mxu0 %v207
  %2174 = vmatprep.subr.mxu0 %v206
  %2175 = vmatpush2.msra.mxu0 %v205
  %2176 = vmatprep.subr.mxu0 %v204
  %2177 = vmatpush2.msra.mxu0 %v203
  %2178 = vmatprep.mubr.f32.mxu0 %v1967
  %2179 = vmatmul.mubr.f32.gmra.mxu0 %v1966
  %v2180 = vpop.f32.mrf.mxu0
  %v2181 = vadd.f32 %v2110, %v2180
  %v2182 = vpop.f32.mrf.mxu0
  %v2183 = vadd.f32 %v2112, %v2182
  %2184 = vdwg.mxu0
  %2185 = vmatprep.subr.mxu0 0.0
  %2186 = vmatpush1.msra.mxu0 0.0
  %2187 = vmatprep.subr.mxu0 0.0
  %2188 = vmatpush1.msra.mxu0 0.0
  %2189 = vmatprep.subr.mxu0 0.0
  %2190 = vmatpush1.msra.mxu0 0.0
  %2191 = vmatprep.subr.mxu0 0.0
  %2192 = vmatpush1.msra.mxu0 0.0
  %2193 = vmatprep.subr.mxu0 0.0
  %2194 = vmatpush1.msra.mxu0 0.0
  %2195 = vmatprep.subr.mxu0 0.0
  %2196 = vmatpush1.msra.mxu0 0.0
  %2197 = vmatprep.subr.mxu0 0.0
  %2198 = vmatpush1.msra.mxu0 0.0
  %2199 = vmatprep.subr.mxu0 0.0
  %2200 = vmatpush1.msra.mxu0 0.0
  %2201 = vmatprep.subr.mxu0 0.0
  %2202 = vmatpush1.msra.mxu0 0.0
  %2203 = vmatprep.subr.mxu0 0.0
  %2204 = vmatpush1.msra.mxu0 0.0
  %2205 = vmatprep.subr.mxu0 0.0
  %2206 = vmatpush1.msra.mxu0 0.0
  %2207 = vmatprep.subr.mxu0 0.0
  %2208 = vmatpush1.msra.mxu0 0.0
  %2209 = vmatprep.subr.mxu0 0.0
  %2210 = vmatpush1.msra.mxu0 0.0
  %2211 = vmatprep.subr.mxu0 0.0
  %2212 = vmatpush1.msra.mxu0 0.0
  %2213 = vmatprep.subr.mxu0 %v238
  %2214 = vmatpush1.msra.mxu0 %v237
  %2215 = vmatprep.subr.mxu0 %v236
  %2216 = vmatpush1.msra.mxu0 %v235
  %2217 = vmatprep.subr.mxu0 0.0
  %2218 = vmatpush2.msra.mxu0 0.0
  %2219 = vmatprep.subr.mxu0 0.0
  %2220 = vmatpush2.msra.mxu0 0.0
  %2221 = vmatprep.subr.mxu0 0.0
  %2222 = vmatpush2.msra.mxu0 0.0
  %2223 = vmatprep.subr.mxu0 0.0
  %2224 = vmatpush2.msra.mxu0 0.0
  %2225 = vmatprep.subr.mxu0 0.0
  %2226 = vmatpush2.msra.mxu0 0.0
  %2227 = vmatprep.subr.mxu0 0.0
  %2228 = vmatpush2.msra.mxu0 0.0
  %2229 = vmatprep.subr.mxu0 0.0
  %2230 = vmatpush2.msra.mxu0 0.0
  %2231 = vmatprep.subr.mxu0 0.0
  %2232 = vmatpush2.msra.mxu0 0.0
  %2233 = vmatprep.subr.mxu0 0.0
  %2234 = vmatpush2.msra.mxu0 0.0
  %2235 = vmatprep.subr.mxu0 0.0
  %2236 = vmatpush2.msra.mxu0 0.0
  %2237 = vmatprep.subr.mxu0 0.0
  %2238 = vmatpush2.msra.mxu0 0.0
  %2239 = vmatprep.subr.mxu0 0.0
  %2240 = vmatpush2.msra.mxu0 0.0
  %2241 = vmatprep.subr.mxu0 0.0
  %2242 = vmatpush2.msra.mxu0 0.0
  %2243 = vmatprep.subr.mxu0 0.0
  %2244 = vmatpush2.msra.mxu0 0.0
  %2245 = vmatprep.subr.mxu0 0.0
  %2246 = vmatpush2.msra.mxu0 0.0
  %2247 = vmatprep.subr.mxu0 0.0
  %2248 = vmatpush2.msra.mxu0 0.0
  %2249 = vmatprep.mubr.f32.mxu0 0.0
  %2250 = vmatmul.mubr.f32.gmra.mxu0 %v1970
  %v2251 = vpop.f32.mrf.mxu0
  %v2252 = vadd.f32 %v2181, %v2251
  %v2253 = vpop.f32.mrf.mxu0
  %v2254 = vadd.f32 %v2183, %v2253
  %2255 = vdwg.mxu0
  %s2256 = scalar_lea.vmem %s0, 1680
  %v2257 = vld [vmem:[%s2256] sm:$0xff]
  %v2258 = vld [vmem:[%s2256 + $0x8] sm:$0xff]
  %v2259 = vld [vmem:[%s2256 + $0x10] sm:$0xff]
  %v2260 = vld [vmem:[%s2256 + $0x18] sm:$0xff]
  %v2261 = vld [vmem:[%s2256 + $0x20] sm:$0xff]
  %v2262 = vld [vmem:[%s2256 + $0x28] sm:$0xff]
  %v2263 = vld [vmem:[%s2256 + $0x30] sm:$0xff]
  %v2264 = vld [vmem:[%s2256 + $0x38] sm:$0xff]
  %v2265 = vld [vmem:[%s2256 + $0x40] sm:$0xff]
  %v2266 = vld [vmem:[%s2256 + $0x48] sm:$0xff]
  %v2267 = vld [vmem:[%s2256 + $0x50] sm:$0xff]
  %v2268 = vld [vmem:[%s2256 + $0x58] sm:$0xff]
  %v2269 = vld [vmem:[%s2256 + $0x60] sm:$0xff]
  %v2270 = vld [vmem:[%s2256 + $0x68] sm:$0xff]
  %v2271 = vld [vmem:[%s2256 + $0x70] sm:$0xff]
  %v2272 = vld [vmem:[%s2256 + $0x78] sm:$0xff]
  %v2273 = vld [vmem:[%s2256 + $0x80] sm:$0xff]
  %v2274 = vld [vmem:[%s2256 + $0x88] sm:$0xff]
  %v2275 = vld [vmem:[%s2256 + $0x90] sm:$0xff]
  %v2276 = vld [vmem:[%s2256 + $0x98] sm:$0xff]
  %v2277 = vld [vmem:[%s2256 + $0xa0] sm:$0xff]
  %v2278 = vld [vmem:[%s2256 + $0xa8] sm:$0xff]
  %v2279 = vld [vmem:[%s2256 + $0xb0] sm:$0xff]
  %v2280 = vld [vmem:[%s2256 + $0xb8] sm:$0xff]
  %v2281 = vld [vmem:[%s2256 + $0xc0] sm:$0xff]
  %v2282 = vld [vmem:[%s2256 + $0xc8] sm:$0xff]
  %v2283 = vld [vmem:[%s2256 + $0xd0] sm:$0xff]
  %v2284 = vld [vmem:[%s2256 + $0xd8] sm:$0xff]
  %v2285 = vld [vmem:[%s2256 + $0xe0] sm:$0xff]
  %v2286 = vld [vmem:[%s2256 + $0xe8] sm:$0xff]
  %v2287 = vld [vmem:[%s2256 + $0xf0] sm:$0xff]
  %v2288 = vld [vmem:[%s2256 + $0xf8] sm:$0xff]
  %v2289 = vld [vmem:[%s2256 + $0x100] sm:$0xff]
  %v2290 = vld [vmem:[%s2256 + $0x108] sm:$0xff]
  %v2291 = vld [vmem:[%s2256 + $0x110] sm:$0xff]
  %v2292 = vld [vmem:[%s2256 + $0x118] sm:$0xff]
  %v2293 = vld [vmem:[%s2256 + $0x120] sm:$0xff]
  %v2294 = vld [vmem:[%s2256 + $0x128] sm:$0xff]
  %v2295 = vld [vmem:[%s2256 + $0x130] sm:$0xff]
  %v2296 = vld [vmem:[%s2256 + $0x138] sm:$0xff]
  %v2297 = vld [vmem:[%s2256 + $0x140] sm:$0xff]
  %v2298 = vld [vmem:[%s2256 + $0x148] sm:$0xff]
  %v2299 = vld [vmem:[%s2256 + $0x150] sm:$0xff]
  %v2300 = vld [vmem:[%s2256 + $0x158] sm:$0xff]
  %v2301 = vld [vmem:[%s2256 + $0x160] sm:$0xff]
  %v2302 = vld [vmem:[%s2256 + $0x168] sm:$0xff]
  %v2303 = vld [vmem:[%s2256 + $0x170] sm:$0xff]
  %v2304 = vld [vmem:[%s2256 + $0x178] sm:$0xff]
  %v2305 = vld [vmem:[%s2256 + $0x180] sm:$0xff]
  %v2306 = vld [vmem:[%s2256 + $0x188] sm:$0xff]
  %v2307 = vld [vmem:[%s2256 + $0x190] sm:$0xff]
  %v2308 = vld [vmem:[%s2256 + $0x198] sm:$0xff]
  %v2309 = vld [vmem:[%s2256 + $0x1a0] sm:$0xff]
  %v2310 = vld [vmem:[%s2256 + $0x1a8] sm:$0xff]
  %v2311 = vld [vmem:[%s2256 + $0x1b0] sm:$0xff]
  %v2312 = vld [vmem:[%s2256 + $0x1b8] sm:$0xff]
  %v2313 = vld [vmem:[%s2256 + $0x1c0] sm:$0xff]
  %v2314 = vld [vmem:[%s2256 + $0x1c8] sm:$0xff]
  %v2315 = vld [vmem:[%s2256 + $0x1d0] sm:$0xff]
  %v2316 = vld [vmem:[%s2256 + $0x1d8] sm:$0xff]
  %v2317 = vld [vmem:[%s2256 + $0x1e0] sm:$0xff]
  %v2318 = vld [vmem:[%s2256 + $0x1e8] sm:$0xff]
  %v2319 = vld [vmem:[%s2256 + $0x1f0] sm:$0xff]
  %v2320 = vld [vmem:[%s2256 + $0x1f8] sm:$0x7]
  %v2321 = vld [vmem:[%s2256 + $0x200] sm:$0x7]
  %v2322 = vld [vmem:[%s2256 + $0x208] sm:$0x7]
  %v2323 = vld [vmem:[%s2256 + $0x210] sm:$0x7]
  %v2324 = vld [vmem:[%s2256 + $0x218] sm:$0x7]
  %v2325 = vld [vmem:[%s2256 + $0x220] sm:$0x7]
  %v2326 = vld [vmem:[%s2256 + $0x228] sm:$0x7]
  %v2328 = vsel %vm318, %v2320, 0
  %v2331 = vsel %vm318, %v2321, 0
  %v2334 = vsel %vm318, %v2322, 0
  %v2337 = vsel %vm318, %v2323, 0
  %v2340 = vsel %vm318, %v2324, 0
  %v2343 = vsel %vm318, %v2325, 0
  %v2346 = vsel %vm318, %v2326, 0
  %2348 = vmatprep.subr.mxu0 0.0
  %2349 = vmatpush1.msra.mxu0 0.0
  %2350 = vmatprep.subr.mxu0 0.0
  %2351 = vmatpush1.msra.mxu0 0.0
  %2352 = vmatprep.subr.mxu0 0.0
  %2353 = vmatpush1.msra.mxu0 0.0
  %2354 = vmatprep.subr.mxu0 0.0
  %2355 = vmatpush1.msra.mxu0 0.0
  %2356 = vmatprep.subr.mxu0 0.0
  %2357 = vmatpush1.msra.mxu0 0.0
  %2358 = vmatprep.subr.mxu0 0.0
  %2359 = vmatpush1.msra.mxu0 0.0
  %2360 = vmatprep.subr.mxu0 %v2331
  %2361 = vmatpush1.msra.mxu0 %v2328
  %2362 = vmatprep.subr.mxu0 %v2314
  %2363 = vmatpush1.msra.mxu0 %v2313
  %2364 = vmatprep.subr.mxu0 %v2307
  %2365 = vmatpush1.msra.mxu0 %v2306
  %2366 = vmatprep.subr.mxu0 %v2300
  %2367 = vmatpush1.msra.mxu0 %v2299
  %2368 = vmatprep.subr.mxu0 %v2293
  %2369 = vmatpush1.msra.mxu0 %v2292
  %2370 = vmatprep.subr.mxu0 %v2286
  %2371 = vmatpush1.msra.mxu0 %v2285
  %2372 = vmatprep.subr.mxu0 %v2279
  %2373 = vmatpush1.msra.mxu0 %v2278
  %2374 = vmatprep.subr.mxu0 %v2272
  %2375 = vmatpush1.msra.mxu0 %v2271
  %2376 = vmatprep.subr.mxu0 %v2265
  %2377 = vmatpush1.msra.mxu0 %v2264
  %2378 = vmatprep.subr.mxu0 %v2258
  %2379 = vmatpush1.msra.mxu0 %v2257
  %2380 = vmatprep.subr.mxu0 0.0
  %2381 = vmatpush2.msra.mxu0 0.0
  %2382 = vmatprep.subr.mxu0 0.0
  %2383 = vmatpush2.msra.mxu0 0.0
  %2384 = vmatprep.subr.mxu0 0.0
  %2385 = vmatpush2.msra.mxu0 0.0
  %2386 = vmatprep.subr.mxu0 0.0
  %2387 = vmatpush2.msra.mxu0 0.0
  %2388 = vmatprep.subr.mxu0 0.0
  %2389 = vmatpush2.msra.mxu0 0.0
  %2390 = vmatprep.subr.mxu0 0.0
  %2391 = vmatpush2.msra.mxu0 0.0
  %2392 = vmatprep.subr.mxu0 0.0
  %2393 = vmatpush2.msra.mxu0 0.0
  %2394 = vmatprep.subr.mxu0 0.0
  %2395 = vmatpush2.msra.mxu0 0.0
  %2396 = vmatprep.subr.mxu0 0.0
  %2397 = vmatpush2.msra.mxu0 0.0
  %2398 = vmatprep.subr.mxu0 0.0
  %2399 = vmatpush2.msra.mxu0 0.0
  %2400 = vmatprep.subr.mxu0 0.0
  %2401 = vmatpush2.msra.mxu0 0.0
  %2402 = vmatprep.subr.mxu0 0.0
  %2403 = vmatpush2.msra.mxu0 0.0
  %2404 = vmatprep.subr.mxu0 0.0
  %2405 = vmatpush2.msra.mxu0 0.0
  %2406 = vmatprep.subr.mxu0 0.0
  %2407 = vmatpush2.msra.mxu0 0.0
  %2408 = vmatprep.subr.mxu0 0.0
  %2409 = vmatpush2.msra.mxu0 0.0
  %2410 = vmatprep.subr.mxu0 0.0
  %2411 = vmatpush2.msra.mxu0 0.0
  %2412 = vmatprep.mubr.f32.mxu0 0.0
  %2413 = vmatmul.mubr.f32.gmra.mxu0 %v316
  %v2414 = vpop.f32.mrf.mxu0
  %v2415 = vadd.f32 %v312, %v2414
  %v2416 = vpop.f32.mrf.mxu0
  %v2417 = vadd.f32 %v312, %v2416
  %2418 = vdwg.mxu0
  %2419 = vmatprep.subr.mxu0 0.0
  %2420 = vmatpush1.msra.mxu0 0.0
  %2421 = vmatprep.subr.mxu0 0.0
  %2422 = vmatpush1.msra.mxu0 0.0
  %2423 = vmatprep.subr.mxu0 0.0
  %2424 = vmatpush1.msra.mxu0 0.0
  %2425 = vmatprep.subr.mxu0 0.0
  %2426 = vmatpush1.msra.mxu0 0.0
  %2427 = vmatprep.subr.mxu0 0.0
  %2428 = vmatpush1.msra.mxu0 0.0
  %2429 = vmatprep.subr.mxu0 0.0
  %2430 = vmatpush1.msra.mxu0 0.0
  %2431 = vmatprep.subr.mxu0 %v2337
  %2432 = vmatpush1.msra.mxu0 %v2334
  %2433 = vmatprep.subr.mxu0 %v2316
  %2434 = vmatpush1.msra.mxu0 %v2315
  %2435 = vmatprep.subr.mxu0 %v2309
  %2436 = vmatpush1.msra.mxu0 %v2308
  %2437 = vmatprep.subr.mxu0 %v2302
  %2438 = vmatpush1.msra.mxu0 %v2301
  %2439 = vmatprep.subr.mxu0 %v2295
  %2440 = vmatpush1.msra.mxu0 %v2294
  %2441 = vmatprep.subr.mxu0 %v2288
  %2442 = vmatpush1.msra.mxu0 %v2287
  %2443 = vmatprep.subr.mxu0 %v2281
  %2444 = vmatpush1.msra.mxu0 %v2280
  %2445 = vmatprep.subr.mxu0 %v2274
  %2446 = vmatpush1.msra.mxu0 %v2273
  %2447 = vmatprep.subr.mxu0 %v2267
  %2448 = vmatpush1.msra.mxu0 %v2266
  %2449 = vmatprep.subr.mxu0 %v2260
  %2450 = vmatpush1.msra.mxu0 %v2259
  %2451 = vmatprep.subr.mxu0 0.0
  %2452 = vmatpush2.msra.mxu0 0.0
  %2453 = vmatprep.subr.mxu0 0.0
  %2454 = vmatpush2.msra.mxu0 0.0
  %2455 = vmatprep.subr.mxu0 0.0
  %2456 = vmatpush2.msra.mxu0 0.0
  %2457 = vmatprep.subr.mxu0 0.0
  %2458 = vmatpush2.msra.mxu0 0.0
  %2459 = vmatprep.subr.mxu0 0.0
  %2460 = vmatpush2.msra.mxu0 0.0
  %2461 = vmatprep.subr.mxu0 0.0
  %2462 = vmatpush2.msra.mxu0 0.0
  %2463 = vmatprep.subr.mxu0 0.0
  %2464 = vmatpush2.msra.mxu0 0.0
  %2465 = vmatprep.subr.mxu0 0.0
  %2466 = vmatpush2.msra.mxu0 0.0
  %2467 = vmatprep.subr.mxu0 0.0
  %2468 = vmatpush2.msra.mxu0 0.0
  %2469 = vmatprep.subr.mxu0 0.0
  %2470 = vmatpush2.msra.mxu0 0.0
  %2471 = vmatprep.subr.mxu0 0.0
  %2472 = vmatpush2.msra.mxu0 0.0
  %2473 = vmatprep.subr.mxu0 0.0
  %2474 = vmatpush2.msra.mxu0 0.0
  %2475 = vmatprep.subr.mxu0 0.0
  %2476 = vmatpush2.msra.mxu0 0.0
  %2477 = vmatprep.subr.mxu0 0.0
  %2478 = vmatpush2.msra.mxu0 0.0
  %2479 = vmatprep.subr.mxu0 0.0
  %2480 = vmatpush2.msra.mxu0 0.0
  %2481 = vmatprep.subr.mxu0 0.0
  %2482 = vmatpush2.msra.mxu0 0.0
  %2483 = vmatprep.mubr.f32.mxu0 0.0
  %2484 = vmatmul.mubr.f32.gmra.mxu0 %v316
  %v2485 = vpop.f32.mrf.mxu0
  %v2486 = vadd.f32 %v312, %v2485
  %v2487 = vpop.f32.mrf.mxu0
  %v2488 = vadd.f32 %v312, %v2487
  %2489 = vdwg.mxu0
  %2490 = vmatprep.subr.mxu0 0.0
  %2491 = vmatpush1.msra.mxu0 0.0
  %2492 = vmatprep.subr.mxu0 0.0
  %2493 = vmatpush1.msra.mxu0 0.0
  %2494 = vmatprep.subr.mxu0 0.0
  %2495 = vmatpush1.msra.mxu0 0.0
  %2496 = vmatprep.subr.mxu0 0.0
  %2497 = vmatpush1.msra.mxu0 0.0
  %2498 = vmatprep.subr.mxu0 0.0
  %2499 = vmatpush1.msra.mxu0 0.0
  %2500 = vmatprep.subr.mxu0 0.0
  %2501 = vmatpush1.msra.mxu0 0.0
  %2502 = vmatprep.subr.mxu0 %v2343
  %2503 = vmatpush1.msra.mxu0 %v2340
  %2504 = vmatprep.subr.mxu0 %v2318
  %2505 = vmatpush1.msra.mxu0 %v2317
  %2506 = vmatprep.subr.mxu0 %v2311
  %2507 = vmatpush1.msra.mxu0 %v2310
  %2508 = vmatprep.subr.mxu0 %v2304
  %2509 = vmatpush1.msra.mxu0 %v2303
  %2510 = vmatprep.subr.mxu0 %v2297
  %2511 = vmatpush1.msra.mxu0 %v2296
  %2512 = vmatprep.subr.mxu0 %v2290
  %2513 = vmatpush1.msra.mxu0 %v2289
  %2514 = vmatprep.subr.mxu0 %v2283
  %2515 = vmatpush1.msra.mxu0 %v2282
  %2516 = vmatprep.subr.mxu0 %v2276
  %2517 = vmatpush1.msra.mxu0 %v2275
  %2518 = vmatprep.subr.mxu0 %v2269
  %2519 = vmatpush1.msra.mxu0 %v2268
  %2520 = vmatprep.subr.mxu0 %v2262
  %2521 = vmatpush1.msra.mxu0 %v2261
  %2522 = vmatprep.subr.mxu0 0.0
  %2523 = vmatpush2.msra.mxu0 0.0
  %2524 = vmatprep.subr.mxu0 0.0
  %2525 = vmatpush2.msra.mxu0 0.0
  %2526 = vmatprep.subr.mxu0 0.0
  %2527 = vmatpush2.msra.mxu0 0.0
  %2528 = vmatprep.subr.mxu0 0.0
  %2529 = vmatpush2.msra.mxu0 0.0
  %2530 = vmatprep.subr.mxu0 0.0
  %2531 = vmatpush2.msra.mxu0 0.0
  %2532 = vmatprep.subr.mxu0 0.0
  %2533 = vmatpush2.msra.mxu0 0.0
  %2534 = vmatprep.subr.mxu0 0.0
  %2535 = vmatpush2.msra.mxu0 0.0
  %2536 = vmatprep.subr.mxu0 0.0
  %2537 = vmatpush2.msra.mxu0 0.0
  %2538 = vmatprep.subr.mxu0 0.0
  %2539 = vmatpush2.msra.mxu0 0.0
  %2540 = vmatprep.subr.mxu0 0.0
  %2541 = vmatpush2.msra.mxu0 0.0
  %2542 = vmatprep.subr.mxu0 0.0
  %2543 = vmatpush2.msra.mxu0 0.0
  %2544 = vmatprep.subr.mxu0 0.0
  %2545 = vmatpush2.msra.mxu0 0.0
  %2546 = vmatprep.subr.mxu0 0.0
  %2547 = vmatpush2.msra.mxu0 0.0
  %2548 = vmatprep.subr.mxu0 0.0
  %2549 = vmatpush2.msra.mxu0 0.0
  %2550 = vmatprep.subr.mxu0 0.0
  %2551 = vmatpush2.msra.mxu0 0.0
  %2552 = vmatprep.subr.mxu0 0.0
  %2553 = vmatpush2.msra.mxu0 0.0
  %2554 = vmatprep.mubr.f32.mxu0 0.0
  %2555 = vmatmul.mubr.f32.gmra.mxu0 %v316
  %v2556 = vpop.f32.mrf.mxu0
  %v2557 = vadd.f32 %v312, %v2556
  %v2558 = vpop.f32.mrf.mxu0
  %v2559 = vadd.f32 %v312, %v2558
  %2560 = vdwg.mxu0
  %2561 = vmatprep.subr.mxu0 0.0
  %2562 = vmatpush1.msra.mxu0 0.0
  %2563 = vmatprep.subr.mxu0 0.0
  %2564 = vmatpush1.msra.mxu0 0.0
  %2565 = vmatprep.subr.mxu0 0.0
  %2566 = vmatpush1.msra.mxu0 0.0
  %2567 = vmatprep.subr.mxu0 0.0
  %2568 = vmatpush1.msra.mxu0 0.0
  %2569 = vmatprep.subr.mxu0 0.0
  %2570 = vmatpush1.msra.mxu0 0.0
  %2571 = vmatprep.subr.mxu0 0.0
  %2572 = vmatpush1.msra.mxu0 0.0
  %2573 = vmatprep.subr.mxu0 0.0
  %2574 = vmatpush1.msra.mxu0 %v2346
  %2575 = vmatprep.subr.mxu0 0.0
  %2576 = vmatpush1.msra.mxu0 %v2319
  %2577 = vmatprep.subr.mxu0 0.0
  %2578 = vmatpush1.msra.mxu0 %v2312
  %2579 = vmatprep.subr.mxu0 0.0
  %2580 = vmatpush1.msra.mxu0 %v2305
  %2581 = vmatprep.subr.mxu0 0.0
  %2582 = vmatpush1.msra.mxu0 %v2298
  %2583 = vmatprep.subr.mxu0 0.0
  %2584 = vmatpush1.msra.mxu0 %v2291
  %2585 = vmatprep.subr.mxu0 0.0
  %2586 = vmatpush1.msra.mxu0 %v2284
  %2587 = vmatprep.subr.mxu0 0.0
  %2588 = vmatpush1.msra.mxu0 %v2277
  %2589 = vmatprep.subr.mxu0 0.0
  %2590 = vmatpush1.msra.mxu0 %v2270
  %2591 = vmatprep.subr.mxu0 0.0
  %2592 = vmatpush1.msra.mxu0 %v2263
  %2593 = vmatprep.subr.mxu0 0.0
  %2594 = vmatpush2.msra.mxu0 0.0
  %2595 = vmatprep.subr.mxu0 0.0
  %2596 = vmatpush2.msra.mxu0 0.0
  %2597 = vmatprep.subr.mxu0 0.0
  %2598 = vmatpush2.msra.mxu0 0.0
  %2599 = vmatprep.subr.mxu0 0.0
  %2600 = vmatpush2.msra.mxu0 0.0
  %2601 = vmatprep.subr.mxu0 0.0
  %2602 = vmatpush2.msra.mxu0 0.0
  %2603 = vmatprep.subr.mxu0 0.0
  %2604 = vmatpush2.msra.mxu0 0.0
  %2605 = vmatprep.subr.mxu0 0.0
  %2606 = vmatpush2.msra.mxu0 0.0
  %2607 = vmatprep.subr.mxu0 0.0
  %2608 = vmatpush2.msra.mxu0 0.0
  %2609 = vmatprep.subr.mxu0 0.0
  %2610 = vmatpush2.msra.mxu0 0.0
  %2611 = vmatprep.subr.mxu0 0.0
  %2612 = vmatpush2.msra.mxu0 0.0
  %2613 = vmatprep.subr.mxu0 0.0
  %2614 = vmatpush2.msra.mxu0 0.0
  %2615 = vmatprep.subr.mxu0 0.0
  %2616 = vmatpush2.msra.mxu0 0.0
  %2617 = vmatprep.subr.mxu0 0.0
  %2618 = vmatpush2.msra.mxu0 0.0
  %2619 = vmatprep.subr.mxu0 0.0
  %2620 = vmatpush2.msra.mxu0 0.0
  %2621 = vmatprep.subr.mxu0 0.0
  %2622 = vmatpush2.msra.mxu0 0.0
  %2623 = vmatprep.subr.mxu0 0.0
  %2624 = vmatpush2.msra.mxu0 0.0
  %2625 = vmatprep.mubr.f32.mxu0 0.0
  %2626 = vmatmul.mubr.f32.gmra.mxu0 %v316
  %v2627 = vpop.f32.mrf.mxu0
  %v2628 = vadd.f32 %v312, %v2627
  %v2629 = vpop.f32.mrf.mxu0
  %2630 = vdwg.mxu0
  %v2631 = vtanh.pop %v2415
  %v2632 = vtanh.pop %v2417
  %v2633 = vtanh.pop %v2486
  %v2634 = vtanh.pop %v2488
  %v2635 = vtanh.pop %v2557
  %v2636 = vtanh.pop %v2559
  %v2637 = vtanh.pop %v2628
  %v2639 = vsel %vm630, %v2637, 0
  %2641 = vmatprep.subr.mxu0 %v74
  %2642 = vmatpush1.msra.mxu0 %v73
  %2643 = vmatprep.subr.mxu0 %v72
  %2644 = vmatpush1.msra.mxu0 %v71
  %2645 = vmatprep.subr.mxu0 %v70
  %2646 = vmatpush1.msra.mxu0 %v69
  %2647 = vmatprep.subr.mxu0 %v68
  %2648 = vmatpush1.msra.mxu0 %v67
  %2649 = vmatprep.subr.mxu0 %v66
  %2650 = vmatpush1.msra.mxu0 %v65
  %2651 = vmatprep.subr.mxu0 %v64
  %2652 = vmatpush1.msra.mxu0 %v63
  %2653 = vmatprep.subr.mxu0 %v62
  %2654 = vmatpush1.msra.mxu0 %v61
  %2655 = vmatprep.subr.mxu0 %v60
  %2656 = vmatpush1.msra.mxu0 %v59
  %2657 = vmatprep.subr.mxu0 %v58
  %2658 = vmatpush1.msra.mxu0 %v57
  %2659 = vmatprep.subr.mxu0 %v56
  %2660 = vmatpush1.msra.mxu0 %v55
  %2661 = vmatprep.subr.mxu0 %v54
  %2662 = vmatpush1.msra.mxu0 %v53
  %2663 = vmatprep.subr.mxu0 %v52
  %2664 = vmatpush1.msra.mxu0 %v51
  %2665 = vmatprep.subr.mxu0 %v50
  %2666 = vmatpush1.msra.mxu0 %v49
  %2667 = vmatprep.subr.mxu0 %v48
  %2668 = vmatpush1.msra.mxu0 %v47
  %2669 = vmatprep.subr.mxu0 %v46
  %2670 = vmatpush1.msra.mxu0 %v45
  %2671 = vmatprep.subr.mxu0 %v44
  %2672 = vmatpush1.msra.mxu0 %v43
  %2673 = vmatprep.subr.mxu0 %v106
  %2674 = vmatpush2.msra.mxu0 %v105
  %2675 = vmatprep.subr.mxu0 %v104
  %2676 = vmatpush2.msra.mxu0 %v103
  %2677 = vmatprep.subr.mxu0 %v102
  %2678 = vmatpush2.msra.mxu0 %v101
  %2679 = vmatprep.subr.mxu0 %v100
  %2680 = vmatpush2.msra.mxu0 %v99
  %2681 = vmatprep.subr.mxu0 %v98
  %2682 = vmatpush2.msra.mxu0 %v97
  %2683 = vmatprep.subr.mxu0 %v96
  %2684 = vmatpush2.msra.mxu0 %v95
  %2685 = vmatprep.subr.mxu0 %v94
  %2686 = vmatpush2.msra.mxu0 %v93
  %2687 = vmatprep.subr.mxu0 %v92
  %2688 = vmatpush2.msra.mxu0 %v91
  %2689 = vmatprep.subr.mxu0 %v90
  %2690 = vmatpush2.msra.mxu0 %v89
  %2691 = vmatprep.subr.mxu0 %v88
  %2692 = vmatpush2.msra.mxu0 %v87
  %2693 = vmatprep.subr.mxu0 %v86
  %2694 = vmatpush2.msra.mxu0 %v85
  %2695 = vmatprep.subr.mxu0 %v84
  %2696 = vmatpush2.msra.mxu0 %v83
  %2697 = vmatprep.subr.mxu0 %v82
  %2698 = vmatpush2.msra.mxu0 %v81
  %2699 = vmatprep.subr.mxu0 %v80
  %2700 = vmatpush2.msra.mxu0 %v79
  %2701 = vmatprep.subr.mxu0 %v78
  %2702 = vmatpush2.msra.mxu0 %v77
  %2703 = vmatprep.subr.mxu0 %v76
  %2704 = vmatpush2.msra.mxu0 %v75
  %2705 = vmatprep.mubr.f32.mxu0 %v2632
  %2706 = vmatmul.mubr.f32.gmra.mxu0 %v2631
  %v2707 = vpop.f32.mrf.mxu0
  %v2708 = vadd.f32 0.0, %v2707
  %v2709 = vpop.f32.mrf.mxu0
  %v2710 = vadd.f32 0.0, %v2709
  %2711 = vdwg.mxu0
  %2712 = vmatprep.subr.mxu0 %v138
  %2713 = vmatpush1.msra.mxu0 %v137
  %2714 = vmatprep.subr.mxu0 %v136
  %2715 = vmatpush1.msra.mxu0 %v135
  %2716 = vmatprep.subr.mxu0 %v134
  %2717 = vmatpush1.msra.mxu0 %v133
  %2718 = vmatprep.subr.mxu0 %v132
  %2719 = vmatpush1.msra.mxu0 %v131
  %2720 = vmatprep.subr.mxu0 %v130
  %2721 = vmatpush1.msra.mxu0 %v129
  %2722 = vmatprep.subr.mxu0 %v128
  %2723 = vmatpush1.msra.mxu0 %v127
  %2724 = vmatprep.subr.mxu0 %v126
  %2725 = vmatpush1.msra.mxu0 %v125
  %2726 = vmatprep.subr.mxu0 %v124
  %2727 = vmatpush1.msra.mxu0 %v123
  %2728 = vmatprep.subr.mxu0 %v122
  %2729 = vmatpush1.msra.mxu0 %v121
  %2730 = vmatprep.subr.mxu0 %v120
  %2731 = vmatpush1.msra.mxu0 %v119
  %2732 = vmatprep.subr.mxu0 %v118
  %2733 = vmatpush1.msra.mxu0 %v117
  %2734 = vmatprep.subr.mxu0 %v116
  %2735 = vmatpush1.msra.mxu0 %v115
  %2736 = vmatprep.subr.mxu0 %v114
  %2737 = vmatpush1.msra.mxu0 %v113
  %2738 = vmatprep.subr.mxu0 %v112
  %2739 = vmatpush1.msra.mxu0 %v111
  %2740 = vmatprep.subr.mxu0 %v110
  %2741 = vmatpush1.msra.mxu0 %v109
  %2742 = vmatprep.subr.mxu0 %v108
  %2743 = vmatpush1.msra.mxu0 %v107
  %2744 = vmatprep.subr.mxu0 %v170
  %2745 = vmatpush2.msra.mxu0 %v169
  %2746 = vmatprep.subr.mxu0 %v168
  %2747 = vmatpush2.msra.mxu0 %v167
  %2748 = vmatprep.subr.mxu0 %v166
  %2749 = vmatpush2.msra.mxu0 %v165
  %2750 = vmatprep.subr.mxu0 %v164
  %2751 = vmatpush2.msra.mxu0 %v163
  %2752 = vmatprep.subr.mxu0 %v162
  %2753 = vmatpush2.msra.mxu0 %v161
  %2754 = vmatprep.subr.mxu0 %v160
  %2755 = vmatpush2.msra.mxu0 %v159
  %2756 = vmatprep.subr.mxu0 %v158
  %2757 = vmatpush2.msra.mxu0 %v157
  %2758 = vmatprep.subr.mxu0 %v156
  %2759 = vmatpush2.msra.mxu0 %v155
  %2760 = vmatprep.subr.mxu0 %v154
  %2761 = vmatpush2.msra.mxu0 %v153
  %2762 = vmatprep.subr.mxu0 %v152
  %2763 = vmatpush2.msra.mxu0 %v151
  %2764 = vmatprep.subr.mxu0 %v150
  %2765 = vmatpush2.msra.mxu0 %v149
  %2766 = vmatprep.subr.mxu0 %v148
  %2767 = vmatpush2.msra.mxu0 %v147
  %2768 = vmatprep.subr.mxu0 %v146
  %2769 = vmatpush2.msra.mxu0 %v145
  %2770 = vmatprep.subr.mxu0 %v144
  %2771 = vmatpush2.msra.mxu0 %v143
  %2772 = vmatprep.subr.mxu0 %v142
  %2773 = vmatpush2.msra.mxu0 %v141
  %2774 = vmatprep.subr.mxu0 %v140
  %2775 = vmatpush2.msra.mxu0 %v139
  %2776 = vmatprep.mubr.f32.mxu0 %v2634
  %2777 = vmatmul.mubr.f32.gmra.mxu0 %v2633
  %v2778 = vpop.f32.mrf.mxu0
  %v2779 = vadd.f32 %v2708, %v2778
  %v2780 = vpop.f32.mrf.mxu0
  %v2781 = vadd.f32 %v2710, %v2780
  %2782 = vdwg.mxu0
  %2783 = vmatprep.subr.mxu0 %v202
  %2784 = vmatpush1.msra.mxu0 %v201
  %2785 = vmatprep.subr.mxu0 %v200
  %2786 = vmatpush1.msra.mxu0 %v199
  %2787 = vmatprep.subr.mxu0 %v198
  %2788 = vmatpush1.msra.mxu0 %v197
  %2789 = vmatprep.subr.mxu0 %v196
  %2790 = vmatpush1.msra.mxu0 %v195
  %2791 = vmatprep.subr.mxu0 %v194
  %2792 = vmatpush1.msra.mxu0 %v193
  %2793 = vmatprep.subr.mxu0 %v192
  %2794 = vmatpush1.msra.mxu0 %v191
  %2795 = vmatprep.subr.mxu0 %v190
  %2796 = vmatpush1.msra.mxu0 %v189
  %2797 = vmatprep.subr.mxu0 %v188
  %2798 = vmatpush1.msra.mxu0 %v187
  %2799 = vmatprep.subr.mxu0 %v186
  %2800 = vmatpush1.msra.mxu0 %v185
  %2801 = vmatprep.subr.mxu0 %v184
  %2802 = vmatpush1.msra.mxu0 %v183
  %2803 = vmatprep.subr.mxu0 %v182
  %2804 = vmatpush1.msra.mxu0 %v181
  %2805 = vmatprep.subr.mxu0 %v180
  %2806 = vmatpush1.msra.mxu0 %v179
  %2807 = vmatprep.subr.mxu0 %v178
  %2808 = vmatpush1.msra.mxu0 %v177
  %2809 = vmatprep.subr.mxu0 %v176
  %2810 = vmatpush1.msra.mxu0 %v175
  %2811 = vmatprep.subr.mxu0 %v174
  %2812 = vmatpush1.msra.mxu0 %v173
  %2813 = vmatprep.subr.mxu0 %v172
  %2814 = vmatpush1.msra.mxu0 %v171
  %2815 = vmatprep.subr.mxu0 %v234
  %2816 = vmatpush2.msra.mxu0 %v233
  %2817 = vmatprep.subr.mxu0 %v232
  %2818 = vmatpush2.msra.mxu0 %v231
  %2819 = vmatprep.subr.mxu0 %v230
  %2820 = vmatpush2.msra.mxu0 %v229
  %2821 = vmatprep.subr.mxu0 %v228
  %2822 = vmatpush2.msra.mxu0 %v227
  %2823 = vmatprep.subr.mxu0 %v226
  %2824 = vmatpush2.msra.mxu0 %v225
  %2825 = vmatprep.subr.mxu0 %v224
  %2826 = vmatpush2.msra.mxu0 %v223
  %2827 = vmatprep.subr.mxu0 %v222
  %2828 = vmatpush2.msra.mxu0 %v221
  %2829 = vmatprep.subr.mxu0 %v220
  %2830 = vmatpush2.msra.mxu0 %v219
  %2831 = vmatprep.subr.mxu0 %v218
  %2832 = vmatpush2.msra.mxu0 %v217
  %2833 = vmatprep.subr.mxu0 %v216
  %2834 = vmatpush2.msra.mxu0 %v215
  %2835 = vmatprep.subr.mxu0 %v214
  %2836 = vmatpush2.msra.mxu0 %v213
  %2837 = vmatprep.subr.mxu0 %v212
  %2838 = vmatpush2.msra.mxu0 %v211
  %2839 = vmatprep.subr.mxu0 %v210
  %2840 = vmatpush2.msra.mxu0 %v209
  %2841 = vmatprep.subr.mxu0 %v208
  %2842 = vmatpush2.msra.mxu0 %v207
  %2843 = vmatprep.subr.mxu0 %v206
  %2844 = vmatpush2.msra.mxu0 %v205
  %2845 = vmatprep.subr.mxu0 %v204
  %2846 = vmatpush2.msra.mxu0 %v203
  %2847 = vmatprep.mubr.f32.mxu0 %v2636
  %2848 = vmatmul.mubr.f32.gmra.mxu0 %v2635
  %v2849 = vpop.f32.mrf.mxu0
  %v2850 = vadd.f32 %v2779, %v2849
  %v2851 = vpop.f32.mrf.mxu0
  %v2852 = vadd.f32 %v2781, %v2851
  %2853 = vdwg.mxu0
  %2854 = vmatprep.subr.mxu0 0.0
  %2855 = vmatpush1.msra.mxu0 0.0
  %2856 = vmatprep.subr.mxu0 0.0
  %2857 = vmatpush1.msra.mxu0 0.0
  %2858 = vmatprep.subr.mxu0 0.0
  %2859 = vmatpush1.msra.mxu0 0.0
  %2860 = vmatprep.subr.mxu0 0.0
  %2861 = vmatpush1.msra.mxu0 0.0
  %2862 = vmatprep.subr.mxu0 0.0
  %2863 = vmatpush1.msra.mxu0 0.0
  %2864 = vmatprep.subr.mxu0 0.0
  %2865 = vmatpush1.msra.mxu0 0.0
  %2866 = vmatprep.subr.mxu0 0.0
  %2867 = vmatpush1.msra.mxu0 0.0
  %2868 = vmatprep.subr.mxu0 0.0
  %2869 = vmatpush1.msra.mxu0 0.0
  %2870 = vmatprep.subr.mxu0 0.0
  %2871 = vmatpush1.msra.mxu0 0.0
  %2872 = vmatprep.subr.mxu0 0.0
  %2873 = vmatpush1.msra.mxu0 0.0
  %2874 = vmatprep.subr.mxu0 0.0
  %2875 = vmatpush1.msra.mxu0 0.0
  %2876 = vmatprep.subr.mxu0 0.0
  %2877 = vmatpush1.msra.mxu0 0.0
  %2878 = vmatprep.subr.mxu0 0.0
  %2879 = vmatpush1.msra.mxu0 0.0
  %2880 = vmatprep.subr.mxu0 0.0
  %2881 = vmatpush1.msra.mxu0 0.0
  %2882 = vmatprep.subr.mxu0 %v238
  %2883 = vmatpush1.msra.mxu0 %v237
  %2884 = vmatprep.subr.mxu0 %v236
  %2885 = vmatpush1.msra.mxu0 %v235
  %2886 = vmatprep.subr.mxu0 0.0
  %2887 = vmatpush2.msra.mxu0 0.0
  %2888 = vmatprep.subr.mxu0 0.0
  %2889 = vmatpush2.msra.mxu0 0.0
  %2890 = vmatprep.subr.mxu0 0.0
  %2891 = vmatpush2.msra.mxu0 0.0
  %2892 = vmatprep.subr.mxu0 0.0
  %2893 = vmatpush2.msra.mxu0 0.0
  %2894 = vmatprep.subr.mxu0 0.0
  %2895 = vmatpush2.msra.mxu0 0.0
  %2896 = vmatprep.subr.mxu0 0.0
  %2897 = vmatpush2.msra.mxu0 0.0
  %2898 = vmatprep.subr.mxu0 0.0
  %2899 = vmatpush2.msra.mxu0 0.0
  %2900 = vmatprep.subr.mxu0 0.0
  %2901 = vmatpush2.msra.mxu0 0.0
  %2902 = vmatprep.subr.mxu0 0.0
  %2903 = vmatpush2.msra.mxu0 0.0
  %2904 = vmatprep.subr.mxu0 0.0
  %2905 = vmatpush2.msra.mxu0 0.0
  %2906 = vmatprep.subr.mxu0 0.0
  %2907 = vmatpush2.msra.mxu0 0.0
  %2908 = vmatprep.subr.mxu0 0.0
  %2909 = vmatpush2.msra.mxu0 0.0
  %2910 = vmatprep.subr.mxu0 0.0
  %2911 = vmatpush2.msra.mxu0 0.0
  %2912 = vmatprep.subr.mxu0 0.0
  %2913 = vmatpush2.msra.mxu0 0.0
  %2914 = vmatprep.subr.mxu0 0.0
  %2915 = vmatpush2.msra.mxu0 0.0
  %2916 = vmatprep.subr.mxu0 0.0
  %2917 = vmatpush2.msra.mxu0 0.0
  %2918 = vmatprep.mubr.f32.mxu0 0.0
  %2919 = vmatmul.mubr.f32.gmra.mxu0 %v2639
  %v2920 = vpop.f32.mrf.mxu0
  %v2921 = vadd.f32 %v2850, %v2920
  %v2922 = vpop.f32.mrf.mxu0
  %v2923 = vadd.f32 %v2852, %v2922
  %2924 = vdwg.mxu0
  %s2925 = scalar_lea.vmem %s0, 2240
  %v2926 = vld [vmem:[%s2925] sm:$0xff]
  %v2927 = vld [vmem:[%s2925 + $0x8] sm:$0xff]
  %v2928 = vld [vmem:[%s2925 + $0x10] sm:$0xff]
  %v2929 = vld [vmem:[%s2925 + $0x18] sm:$0xff]
  %v2930 = vld [vmem:[%s2925 + $0x20] sm:$0xff]
  %v2931 = vld [vmem:[%s2925 + $0x28] sm:$0xff]
  %v2932 = vld [vmem:[%s2925 + $0x30] sm:$0xff]
  %v2933 = vld [vmem:[%s2925 + $0x38] sm:$0xff]
  %v2934 = vld [vmem:[%s2925 + $0x40] sm:$0xff]
  %v2935 = vld [vmem:[%s2925 + $0x48] sm:$0xff]
  %v2936 = vld [vmem:[%s2925 + $0x50] sm:$0xff]
  %v2937 = vld [vmem:[%s2925 + $0x58] sm:$0xff]
  %v2938 = vld [vmem:[%s2925 + $0x60] sm:$0xff]
  %v2939 = vld [vmem:[%s2925 + $0x68] sm:$0xff]
  %v2940 = vld [vmem:[%s2925 + $0x70] sm:$0xff]
  %v2941 = vld [vmem:[%s2925 + $0x78] sm:$0xff]
  %v2942 = vld [vmem:[%s2925 + $0x80] sm:$0xff]
  %v2943 = vld [vmem:[%s2925 + $0x88] sm:$0xff]
  %v2944 = vld [vmem:[%s2925 + $0x90] sm:$0xff]
  %v2945 = vld [vmem:[%s2925 + $0x98] sm:$0xff]
  %v2946 = vld [vmem:[%s2925 + $0xa0] sm:$0xff]
  %v2947 = vld [vmem:[%s2925 + $0xa8] sm:$0xff]
  %v2948 = vld [vmem:[%s2925 + $0xb0] sm:$0xff]
  %v2949 = vld [vmem:[%s2925 + $0xb8] sm:$0xff]
  %v2950 = vld [vmem:[%s2925 + $0xc0] sm:$0xff]
  %v2951 = vld [vmem:[%s2925 + $0xc8] sm:$0xff]
  %v2952 = vld [vmem:[%s2925 + $0xd0] sm:$0xff]
  %v2953 = vld [vmem:[%s2925 + $0xd8] sm:$0xff]
  %v2954 = vld [vmem:[%s2925 + $0xe0] sm:$0xff]
  %v2955 = vld [vmem:[%s2925 + $0xe8] sm:$0xff]
  %v2956 = vld [vmem:[%s2925 + $0xf0] sm:$0xff]
  %v2957 = vld [vmem:[%s2925 + $0xf8] sm:$0xff]
  %v2958 = vld [vmem:[%s2925 + $0x100] sm:$0xff]
  %v2959 = vld [vmem:[%s2925 + $0x108] sm:$0xff]
  %v2960 = vld [vmem:[%s2925 + $0x110] sm:$0xff]
  %v2961 = vld [vmem:[%s2925 + $0x118] sm:$0xff]
  %v2962 = vld [vmem:[%s2925 + $0x120] sm:$0xff]
  %v2963 = vld [vmem:[%s2925 + $0x128] sm:$0xff]
  %v2964 = vld [vmem:[%s2925 + $0x130] sm:$0xff]
  %v2965 = vld [vmem:[%s2925 + $0x138] sm:$0xff]
  %v2966 = vld [vmem:[%s2925 + $0x140] sm:$0xff]
  %v2967 = vld [vmem:[%s2925 + $0x148] sm:$0xff]
  %v2968 = vld [vmem:[%s2925 + $0x150] sm:$0xff]
  %v2969 = vld [vmem:[%s2925 + $0x158] sm:$0xff]
  %v2970 = vld [vmem:[%s2925 + $0x160] sm:$0xff]
  %v2971 = vld [vmem:[%s2925 + $0x168] sm:$0xff]
  %v2972 = vld [vmem:[%s2925 + $0x170] sm:$0xff]
  %v2973 = vld [vmem:[%s2925 + $0x178] sm:$0xff]
  %v2974 = vld [vmem:[%s2925 + $0x180] sm:$0xff]
  %v2975 = vld [vmem:[%s2925 + $0x188] sm:$0xff]
  %v2976 = vld [vmem:[%s2925 + $0x190] sm:$0xff]
  %v2977 = vld [vmem:[%s2925 + $0x198] sm:$0xff]
  %v2978 = vld [vmem:[%s2925 + $0x1a0] sm:$0xff]
  %v2979 = vld [vmem:[%s2925 + $0x1a8] sm:$0xff]
  %v2980 = vld [vmem:[%s2925 + $0x1b0] sm:$0xff]
  %v2981 = vld [vmem:[%s2925 + $0x1b8] sm:$0xff]
  %v2982 = vld [vmem:[%s2925 + $0x1c0] sm:$0xff]
  %v2983 = vld [vmem:[%s2925 + $0x1c8] sm:$0xff]
  %v2984 = vld [vmem:[%s2925 + $0x1d0] sm:$0xff]
  %v2985 = vld [vmem:[%s2925 + $0x1d8] sm:$0xff]
  %v2986 = vld [vmem:[%s2925 + $0x1e0] sm:$0xff]
  %v2987 = vld [vmem:[%s2925 + $0x1e8] sm:$0xff]
  %v2988 = vld [vmem:[%s2925 + $0x1f0] sm:$0xff]
  %v2989 = vld [vmem:[%s2925 + $0x1f8] sm:$0x7]
  %v2990 = vld [vmem:[%s2925 + $0x200] sm:$0x7]
  %v2991 = vld [vmem:[%s2925 + $0x208] sm:$0x7]
  %v2992 = vld [vmem:[%s2925 + $0x210] sm:$0x7]
  %v2993 = vld [vmem:[%s2925 + $0x218] sm:$0x7]
  %v2994 = vld [vmem:[%s2925 + $0x220] sm:$0x7]
  %v2995 = vld [vmem:[%s2925 + $0x228] sm:$0x7]
  %v2997 = vsel %vm318, %v2989, 0
  %v3000 = vsel %vm318, %v2990, 0
  %v3003 = vsel %vm318, %v2991, 0
  %v3006 = vsel %vm318, %v2992, 0
  %v3009 = vsel %vm318, %v2993, 0
  %v3012 = vsel %vm318, %v2994, 0
  %v3015 = vsel %vm318, %v2995, 0
  %3017 = vmatprep.subr.mxu0 0.0
  %3018 = vmatpush1.msra.mxu0 0.0
  %3019 = vmatprep.subr.mxu0 0.0
  %3020 = vmatpush1.msra.mxu0 0.0
  %3021 = vmatprep.subr.mxu0 0.0
  %3022 = vmatpush1.msra.mxu0 0.0
  %3023 = vmatprep.subr.mxu0 0.0
  %3024 = vmatpush1.msra.mxu0 0.0
  %3025 = vmatprep.subr.mxu0 0.0
  %3026 = vmatpush1.msra.mxu0 0.0
  %3027 = vmatprep.subr.mxu0 0.0
  %3028 = vmatpush1.msra.mxu0 0.0
  %3029 = vmatprep.subr.mxu0 %v3000
  %3030 = vmatpush1.msra.mxu0 %v2997
  %3031 = vmatprep.subr.mxu0 %v2983
  %3032 = vmatpush1.msra.mxu0 %v2982
  %3033 = vmatprep.subr.mxu0 %v2976
  %3034 = vmatpush1.msra.mxu0 %v2975
  %3035 = vmatprep.subr.mxu0 %v2969
  %3036 = vmatpush1.msra.mxu0 %v2968
  %3037 = vmatprep.subr.mxu0 %v2962
  %3038 = vmatpush1.msra.mxu0 %v2961
  %3039 = vmatprep.subr.mxu0 %v2955
  %3040 = vmatpush1.msra.mxu0 %v2954
  %3041 = vmatprep.subr.mxu0 %v2948
  %3042 = vmatpush1.msra.mxu0 %v2947
  %3043 = vmatprep.subr.mxu0 %v2941
  %3044 = vmatpush1.msra.mxu0 %v2940
  %3045 = vmatprep.subr.mxu0 %v2934
  %3046 = vmatpush1.msra.mxu0 %v2933
  %3047 = vmatprep.subr.mxu0 %v2927
  %3048 = vmatpush1.msra.mxu0 %v2926
  %3049 = vmatprep.subr.mxu0 0.0
  %3050 = vmatpush2.msra.mxu0 0.0
  %3051 = vmatprep.subr.mxu0 0.0
  %3052 = vmatpush2.msra.mxu0 0.0
  %3053 = vmatprep.subr.mxu0 0.0
  %3054 = vmatpush2.msra.mxu0 0.0
  %3055 = vmatprep.subr.mxu0 0.0
  %3056 = vmatpush2.msra.mxu0 0.0
  %3057 = vmatprep.subr.mxu0 0.0
  %3058 = vmatpush2.msra.mxu0 0.0
  %3059 = vmatprep.subr.mxu0 0.0
  %3060 = vmatpush2.msra.mxu0 0.0
  %3061 = vmatprep.subr.mxu0 0.0
  %3062 = vmatpush2.msra.mxu0 0.0
  %3063 = vmatprep.subr.mxu0 0.0
  %3064 = vmatpush2.msra.mxu0 0.0
  %3065 = vmatprep.subr.mxu0 0.0
  %3066 = vmatpush2.msra.mxu0 0.0
  %3067 = vmatprep.subr.mxu0 0.0
  %3068 = vmatpush2.msra.mxu0 0.0
  %3069 = vmatprep.subr.mxu0 0.0
  %3070 = vmatpush2.msra.mxu0 0.0
  %3071 = vmatprep.subr.mxu0 0.0
  %3072 = vmatpush2.msra.mxu0 0.0
  %3073 = vmatprep.subr.mxu0 0.0
  %3074 = vmatpush2.msra.mxu0 0.0
  %3075 = vmatprep.subr.mxu0 0.0
  %3076 = vmatpush2.msra.mxu0 0.0
  %3077 = vmatprep.subr.mxu0 0.0
  %3078 = vmatpush2.msra.mxu0 0.0
  %3079 = vmatprep.subr.mxu0 0.0
  %3080 = vmatpush2.msra.mxu0 0.0
  %3081 = vmatprep.mubr.f32.mxu0 0.0
  %3082 = vmatmul.mubr.f32.gmra.mxu0 %v316
  %v3083 = vpop.f32.mrf.mxu0
  %v3084 = vadd.f32 %v312, %v3083
  %v3085 = vpop.f32.mrf.mxu0
  %v3086 = vadd.f32 %v312, %v3085
  %3087 = vdwg.mxu0
  %3088 = vmatprep.subr.mxu0 0.0
  %3089 = vmatpush1.msra.mxu0 0.0
  %3090 = vmatprep.subr.mxu0 0.0
  %3091 = vmatpush1.msra.mxu0 0.0
  %3092 = vmatprep.subr.mxu0 0.0
  %3093 = vmatpush1.msra.mxu0 0.0
  %3094 = vmatprep.subr.mxu0 0.0
  %3095 = vmatpush1.msra.mxu0 0.0
  %3096 = vmatprep.subr.mxu0 0.0
  %3097 = vmatpush1.msra.mxu0 0.0
  %3098 = vmatprep.subr.mxu0 0.0
  %3099 = vmatpush1.msra.mxu0 0.0
  %3100 = vmatprep.subr.mxu0 %v3006
  %3101 = vmatpush1.msra.mxu0 %v3003
  %3102 = vmatprep.subr.mxu0 %v2985
  %3103 = vmatpush1.msra.mxu0 %v2984
  %3104 = vmatprep.subr.mxu0 %v2978
  %3105 = vmatpush1.msra.mxu0 %v2977
  %3106 = vmatprep.subr.mxu0 %v2971
  %3107 = vmatpush1.msra.mxu0 %v2970
  %3108 = vmatprep.subr.mxu0 %v2964
  %3109 = vmatpush1.msra.mxu0 %v2963
  %3110 = vmatprep.subr.mxu0 %v2957
  %3111 = vmatpush1.msra.mxu0 %v2956
  %3112 = vmatprep.subr.mxu0 %v2950
  %3113 = vmatpush1.msra.mxu0 %v2949
  %3114 = vmatprep.subr.mxu0 %v2943
  %3115 = vmatpush1.msra.mxu0 %v2942
  %3116 = vmatprep.subr.mxu0 %v2936
  %3117 = vmatpush1.msra.mxu0 %v2935
  %3118 = vmatprep.subr.mxu0 %v2929
  %3119 = vmatpush1.msra.mxu0 %v2928
  %3120 = vmatprep.subr.mxu0 0.0
  %3121 = vmatpush2.msra.mxu0 0.0
  %3122 = vmatprep.subr.mxu0 0.0
  %3123 = vmatpush2.msra.mxu0 0.0
  %3124 = vmatprep.subr.mxu0 0.0
  %3125 = vmatpush2.msra.mxu0 0.0
  %3126 = vmatprep.subr.mxu0 0.0
  %3127 = vmatpush2.msra.mxu0 0.0
  %3128 = vmatprep.subr.mxu0 0.0
  %3129 = vmatpush2.msra.mxu0 0.0
  %3130 = vmatprep.subr.mxu0 0.0
  %3131 = vmatpush2.msra.mxu0 0.0
  %3132 = vmatprep.subr.mxu0 0.0
  %3133 = vmatpush2.msra.mxu0 0.0
  %3134 = vmatprep.subr.mxu0 0.0
  %3135 = vmatpush2.msra.mxu0 0.0
  %3136 = vmatprep.subr.mxu0 0.0
  %3137 = vmatpush2.msra.mxu0 0.0
  %3138 = vmatprep.subr.mxu0 0.0
  %3139 = vmatpush2.msra.mxu0 0.0
  %3140 = vmatprep.subr.mxu0 0.0
  %3141 = vmatpush2.msra.mxu0 0.0
  %3142 = vmatprep.subr.mxu0 0.0
  %3143 = vmatpush2.msra.mxu0 0.0
  %3144 = vmatprep.subr.mxu0 0.0
  %3145 = vmatpush2.msra.mxu0 0.0
  %3146 = vmatprep.subr.mxu0 0.0
  %3147 = vmatpush2.msra.mxu0 0.0
  %3148 = vmatprep.subr.mxu0 0.0
  %3149 = vmatpush2.msra.mxu0 0.0
  %3150 = vmatprep.subr.mxu0 0.0
  %3151 = vmatpush2.msra.mxu0 0.0
  %3152 = vmatprep.mubr.f32.mxu0 0.0
  %3153 = vmatmul.mubr.f32.gmra.mxu0 %v316
  %v3154 = vpop.f32.mrf.mxu0
  %v3155 = vadd.f32 %v312, %v3154
  %v3156 = vpop.f32.mrf.mxu0
  %v3157 = vadd.f32 %v312, %v3156
  %3158 = vdwg.mxu0
  %3159 = vmatprep.subr.mxu0 0.0
  %3160 = vmatpush1.msra.mxu0 0.0
  %3161 = vmatprep.subr.mxu0 0.0
  %3162 = vmatpush1.msra.mxu0 0.0
  %3163 = vmatprep.subr.mxu0 0.0
  %3164 = vmatpush1.msra.mxu0 0.0
  %3165 = vmatprep.subr.mxu0 0.0
  %3166 = vmatpush1.msra.mxu0 0.0
  %3167 = vmatprep.subr.mxu0 0.0
  %3168 = vmatpush1.msra.mxu0 0.0
  %3169 = vmatprep.subr.mxu0 0.0
  %3170 = vmatpush1.msra.mxu0 0.0
  %3171 = vmatprep.subr.mxu0 %v3012
  %3172 = vmatpush1.msra.mxu0 %v3009
  %3173 = vmatprep.subr.mxu0 %v2987
  %3174 = vmatpush1.msra.mxu0 %v2986
  %3175 = vmatprep.subr.mxu0 %v2980
  %3176 = vmatpush1.msra.mxu0 %v2979
  %3177 = vmatprep.subr.mxu0 %v2973
  %3178 = vmatpush1.msra.mxu0 %v2972
  %3179 = vmatprep.subr.mxu0 %v2966
  %3180 = vmatpush1.msra.mxu0 %v2965
  %3181 = vmatprep.subr.mxu0 %v2959
  %3182 = vmatpush1.msra.mxu0 %v2958
  %3183 = vmatprep.subr.mxu0 %v2952
  %3184 = vmatpush1.msra.mxu0 %v2951
  %3185 = vmatprep.subr.mxu0 %v2945
  %3186 = vmatpush1.msra.mxu0 %v2944
  %3187 = vmatprep.subr.mxu0 %v2938
  %3188 = vmatpush1.msra.mxu0 %v2937
  %3189 = vmatprep.subr.mxu0 %v2931
  %3190 = vmatpush1.msra.mxu0 %v2930
  %3191 = vmatprep.subr.mxu0 0.0
  %3192 = vmatpush2.msra.mxu0 0.0
  %3193 = vmatprep.subr.mxu0 0.0
  %3194 = vmatpush2.msra.mxu0 0.0
  %3195 = vmatprep.subr.mxu0 0.0
  %3196 = vmatpush2.msra.mxu0 0.0
  %3197 = vmatprep.subr.mxu0 0.0
  %3198 = vmatpush2.msra.mxu0 0.0
  %3199 = vmatprep.subr.mxu0 0.0
  %3200 = vmatpush2.msra.mxu0 0.0
  %3201 = vmatprep.subr.mxu0 0.0
  %3202 = vmatpush2.msra.mxu0 0.0
  %3203 = vmatprep.subr.mxu0 0.0
  %3204 = vmatpush2.msra.mxu0 0.0
  %3205 = vmatprep.subr.mxu0 0.0
  %3206 = vmatpush2.msra.mxu0 0.0
  %3207 = vmatprep.subr.mxu0 0.0
  %3208 = vmatpush2.msra.mxu0 0.0
  %3209 = vmatprep.subr.mxu0 0.0
  %3210 = vmatpush2.msra.mxu0 0.0
  %3211 = vmatprep.subr.mxu0 0.0
  %3212 = vmatpush2.msra.mxu0 0.0
  %3213 = vmatprep.subr.mxu0 0.0
  %3214 = vmatpush2.msra.mxu0 0.0
  %3215 = vmatprep.subr.mxu0 0.0
  %3216 = vmatpush2.msra.mxu0 0.0
  %3217 = vmatprep.subr.mxu0 0.0
  %3218 = vmatpush2.msra.mxu0 0.0
  %3219 = vmatprep.subr.mxu0 0.0
  %3220 = vmatpush2.msra.mxu0 0.0
  %3221 = vmatprep.subr.mxu0 0.0
  %3222 = vmatpush2.msra.mxu0 0.0
  %3223 = vmatprep.mubr.f32.mxu0 0.0
  %3224 = vmatmul.mubr.f32.gmra.mxu0 %v316
  %v3225 = vpop.f32.mrf.mxu0
  %v3226 = vadd.f32 %v312, %v3225
  %v3227 = vpop.f32.mrf.mxu0
  %v3228 = vadd.f32 %v312, %v3227
  %3229 = vdwg.mxu0
  %3230 = vmatprep.subr.mxu0 0.0
  %3231 = vmatpush1.msra.mxu0 0.0
  %3232 = vmatprep.subr.mxu0 0.0
  %3233 = vmatpush1.msra.mxu0 0.0
  %3234 = vmatprep.subr.mxu0 0.0
  %3235 = vmatpush1.msra.mxu0 0.0
  %3236 = vmatprep.subr.mxu0 0.0
  %3237 = vmatpush1.msra.mxu0 0.0
  %3238 = vmatprep.subr.mxu0 0.0
  %3239 = vmatpush1.msra.mxu0 0.0
  %3240 = vmatprep.subr.mxu0 0.0
  %3241 = vmatpush1.msra.mxu0 0.0
  %3242 = vmatprep.subr.mxu0 0.0
  %3243 = vmatpush1.msra.mxu0 %v3015
  %3244 = vmatprep.subr.mxu0 0.0
  %3245 = vmatpush1.msra.mxu0 %v2988
  %3246 = vmatprep.subr.mxu0 0.0
  %3247 = vmatpush1.msra.mxu0 %v2981
  %3248 = vmatprep.subr.mxu0 0.0
  %3249 = vmatpush1.msra.mxu0 %v2974
  %3250 = vmatprep.subr.mxu0 0.0
  %3251 = vmatpush1.msra.mxu0 %v2967
  %3252 = vmatprep.subr.mxu0 0.0
  %3253 = vmatpush1.msra.mxu0 %v2960
  %3254 = vmatprep.subr.mxu0 0.0
  %3255 = vmatpush1.msra.mxu0 %v2953
  %3256 = vmatprep.subr.mxu0 0.0
  %3257 = vmatpush1.msra.mxu0 %v2946
  %3258 = vmatprep.subr.mxu0 0.0
  %3259 = vmatpush1.msra.mxu0 %v2939
  %3260 = vmatprep.subr.mxu0 0.0
  %3261 = vmatpush1.msra.mxu0 %v2932
  %3262 = vmatprep.subr.mxu0 0.0
  %3263 = vmatpush2.msra.mxu0 0.0
  %3264 = vmatprep.subr.mxu0 0.0
  %3265 = vmatpush2.msra.mxu0 0.0
  %3266 = vmatprep.subr.mxu0 0.0
  %3267 = vmatpush2.msra.mxu0 0.0
  %3268 = vmatprep.subr.mxu0 0.0
  %3269 = vmatpush2.msra.mxu0 0.0
  %3270 = vmatprep.subr.mxu0 0.0
  %3271 = vmatpush2.msra.mxu0 0.0
  %3272 = vmatprep.subr.mxu0 0.0
  %3273 = vmatpush2.msra.mxu0 0.0
  %3274 = vmatprep.subr.mxu0 0.0
  %3275 = vmatpush2.msra.mxu0 0.0
  %3276 = vmatprep.subr.mxu0 0.0
  %3277 = vmatpush2.msra.mxu0 0.0
  %3278 = vmatprep.subr.mxu0 0.0
  %3279 = vmatpush2.msra.mxu0 0.0
  %3280 = vmatprep.subr.mxu0 0.0
  %3281 = vmatpush2.msra.mxu0 0.0
  %3282 = vmatprep.subr.mxu0 0.0
  %3283 = vmatpush2.msra.mxu0 0.0
  %3284 = vmatprep.subr.mxu0 0.0
  %3285 = vmatpush2.msra.mxu0 0.0
  %3286 = vmatprep.subr.mxu0 0.0
  %3287 = vmatpush2.msra.mxu0 0.0
  %3288 = vmatprep.subr.mxu0 0.0
  %3289 = vmatpush2.msra.mxu0 0.0
  %3290 = vmatprep.subr.mxu0 0.0
  %3291 = vmatpush2.msra.mxu0 0.0
  %3292 = vmatprep.subr.mxu0 0.0
  %3293 = vmatpush2.msra.mxu0 0.0
  %3294 = vmatprep.mubr.f32.mxu0 0.0
  %3295 = vmatmul.mubr.f32.gmra.mxu0 %v316
  %v3296 = vpop.f32.mrf.mxu0
  %v3297 = vadd.f32 %v312, %v3296
  %v3298 = vpop.f32.mrf.mxu0
  %3299 = vdwg.mxu0
  %v3300 = vtanh.pop %v3084
  %v3301 = vtanh.pop %v3086
  %v3302 = vtanh.pop %v3155
  %v3303 = vtanh.pop %v3157
  %v3304 = vtanh.pop %v3226
  %v3305 = vtanh.pop %v3228
  %v3306 = vtanh.pop %v3297
  %v3308 = vsel %vm630, %v3306, 0
  %3310 = vmatprep.subr.mxu0 %v74
  %3311 = vmatpush1.msra.mxu0 %v73
  %3312 = vmatprep.subr.mxu0 %v72
  %3313 = vmatpush1.msra.mxu0 %v71
  %3314 = vmatprep.subr.mxu0 %v70
  %3315 = vmatpush1.msra.mxu0 %v69
  %3316 = vmatprep.subr.mxu0 %v68
  %3317 = vmatpush1.msra.mxu0 %v67
  %3318 = vmatprep.subr.mxu0 %v66
  %3319 = vmatpush1.msra.mxu0 %v65
  %3320 = vmatprep.subr.mxu0 %v64
  %3321 = vmatpush1.msra.mxu0 %v63
  %3322 = vmatprep.subr.mxu0 %v62
  %3323 = vmatpush1.msra.mxu0 %v61
  %3324 = vmatprep.subr.mxu0 %v60
  %3325 = vmatpush1.msra.mxu0 %v59
  %3326 = vmatprep.subr.mxu0 %v58
  %3327 = vmatpush1.msra.mxu0 %v57
  %3328 = vmatprep.subr.mxu0 %v56
  %3329 = vmatpush1.msra.mxu0 %v55
  %3330 = vmatprep.subr.mxu0 %v54
  %3331 = vmatpush1.msra.mxu0 %v53
  %3332 = vmatprep.subr.mxu0 %v52
  %3333 = vmatpush1.msra.mxu0 %v51
  %3334 = vmatprep.subr.mxu0 %v50
  %3335 = vmatpush1.msra.mxu0 %v49
  %3336 = vmatprep.subr.mxu0 %v48
  %3337 = vmatpush1.msra.mxu0 %v47
  %3338 = vmatprep.subr.mxu0 %v46
  %3339 = vmatpush1.msra.mxu0 %v45
  %3340 = vmatprep.subr.mxu0 %v44
  %3341 = vmatpush1.msra.mxu0 %v43
  %3342 = vmatprep.subr.mxu0 %v106
  %3343 = vmatpush2.msra.mxu0 %v105
  %3344 = vmatprep.subr.mxu0 %v104
  %3345 = vmatpush2.msra.mxu0 %v103
  %3346 = vmatprep.subr.mxu0 %v102
  %3347 = vmatpush2.msra.mxu0 %v101
  %3348 = vmatprep.subr.mxu0 %v100
  %3349 = vmatpush2.msra.mxu0 %v99
  %3350 = vmatprep.subr.mxu0 %v98
  %3351 = vmatpush2.msra.mxu0 %v97
  %3352 = vmatprep.subr.mxu0 %v96
  %3353 = vmatpush2.msra.mxu0 %v95
  %3354 = vmatprep.subr.mxu0 %v94
  %3355 = vmatpush2.msra.mxu0 %v93
  %3356 = vmatprep.subr.mxu0 %v92
  %3357 = vmatpush2.msra.mxu0 %v91
  %3358 = vmatprep.subr.mxu0 %v90
  %3359 = vmatpush2.msra.mxu0 %v89
  %3360 = vmatprep.subr.mxu0 %v88
  %3361 = vmatpush2.msra.mxu0 %v87
  %3362 = vmatprep.subr.mxu0 %v86
  %3363 = vmatpush2.msra.mxu0 %v85
  %3364 = vmatprep.subr.mxu0 %v84
  %3365 = vmatpush2.msra.mxu0 %v83
  %3366 = vmatprep.subr.mxu0 %v82
  %3367 = vmatpush2.msra.mxu0 %v81
  %3368 = vmatprep.subr.mxu0 %v80
  %3369 = vmatpush2.msra.mxu0 %v79
  %3370 = vmatprep.subr.mxu0 %v78
  %3371 = vmatpush2.msra.mxu0 %v77
  %3372 = vmatprep.subr.mxu0 %v76
  %3373 = vmatpush2.msra.mxu0 %v75
  %3374 = vmatprep.mubr.f32.mxu0 %v3301
  %3375 = vmatmul.mubr.f32.gmra.mxu0 %v3300
  %v3376 = vpop.f32.mrf.mxu0
  %v3377 = vadd.f32 0.0, %v3376
  %v3378 = vpop.f32.mrf.mxu0
  %v3379 = vadd.f32 0.0, %v3378
  %3380 = vdwg.mxu0
  %3381 = vmatprep.subr.mxu0 %v138
  %3382 = vmatpush1.msra.mxu0 %v137
  %3383 = vmatprep.subr.mxu0 %v136
  %3384 = vmatpush1.msra.mxu0 %v135
  %3385 = vmatprep.subr.mxu0 %v134
  %3386 = vmatpush1.msra.mxu0 %v133
  %3387 = vmatprep.subr.mxu0 %v132
  %3388 = vmatpush1.msra.mxu0 %v131
  %3389 = vmatprep.subr.mxu0 %v130
  %3390 = vmatpush1.msra.mxu0 %v129
  %3391 = vmatprep.subr.mxu0 %v128
  %3392 = vmatpush1.msra.mxu0 %v127
  %3393 = vmatprep.subr.mxu0 %v126
  %3394 = vmatpush1.msra.mxu0 %v125
  %3395 = vmatprep.subr.mxu0 %v124
  %3396 = vmatpush1.msra.mxu0 %v123
  %3397 = vmatprep.subr.mxu0 %v122
  %3398 = vmatpush1.msra.mxu0 %v121
  %3399 = vmatprep.subr.mxu0 %v120
  %3400 = vmatpush1.msra.mxu0 %v119
  %3401 = vmatprep.subr.mxu0 %v118
  %3402 = vmatpush1.msra.mxu0 %v117
  %3403 = vmatprep.subr.mxu0 %v116
  %3404 = vmatpush1.msra.mxu0 %v115
  %3405 = vmatprep.subr.mxu0 %v114
  %3406 = vmatpush1.msra.mxu0 %v113
  %3407 = vmatprep.subr.mxu0 %v112
  %3408 = vmatpush1.msra.mxu0 %v111
  %3409 = vmatprep.subr.mxu0 %v110
  %3410 = vmatpush1.msra.mxu0 %v109
  %3411 = vmatprep.subr.mxu0 %v108
  %3412 = vmatpush1.msra.mxu0 %v107
  %3413 = vmatprep.subr.mxu0 %v170
  %3414 = vmatpush2.msra.mxu0 %v169
  %3415 = vmatprep.subr.mxu0 %v168
  %3416 = vmatpush2.msra.mxu0 %v167
  %3417 = vmatprep.subr.mxu0 %v166
  %3418 = vmatpush2.msra.mxu0 %v165
  %3419 = vmatprep.subr.mxu0 %v164
  %3420 = vmatpush2.msra.mxu0 %v163
  %3421 = vmatprep.subr.mxu0 %v162
  %3422 = vmatpush2.msra.mxu0 %v161
  %3423 = vmatprep.subr.mxu0 %v160
  %3424 = vmatpush2.msra.mxu0 %v159
  %3425 = vmatprep.subr.mxu0 %v158
  %3426 = vmatpush2.msra.mxu0 %v157
  %3427 = vmatprep.subr.mxu0 %v156
  %3428 = vmatpush2.msra.mxu0 %v155
  %3429 = vmatprep.subr.mxu0 %v154
  %3430 = vmatpush2.msra.mxu0 %v153
  %3431 = vmatprep.subr.mxu0 %v152
  %3432 = vmatpush2.msra.mxu0 %v151
  %3433 = vmatprep.subr.mxu0 %v150
  %3434 = vmatpush2.msra.mxu0 %v149
  %3435 = vmatprep.subr.mxu0 %v148
  %3436 = vmatpush2.msra.mxu0 %v147
  %3437 = vmatprep.subr.mxu0 %v146
  %3438 = vmatpush2.msra.mxu0 %v145
  %3439 = vmatprep.subr.mxu0 %v144
  %3440 = vmatpush2.msra.mxu0 %v143
  %3441 = vmatprep.subr.mxu0 %v142
  %3442 = vmatpush2.msra.mxu0 %v141
  %3443 = vmatprep.subr.mxu0 %v140
  %3444 = vmatpush2.msra.mxu0 %v139
  %3445 = vmatprep.mubr.f32.mxu0 %v3303
  %3446 = vmatmul.mubr.f32.gmra.mxu0 %v3302
  %v3447 = vpop.f32.mrf.mxu0
  %v3448 = vadd.f32 %v3377, %v3447
  %v3449 = vpop.f32.mrf.mxu0
  %v3450 = vadd.f32 %v3379, %v3449
  %3451 = vdwg.mxu0
  %3452 = vmatprep.subr.mxu0 %v202
  %3453 = vmatpush1.msra.mxu0 %v201
  %3454 = vmatprep.subr.mxu0 %v200
  %3455 = vmatpush1.msra.mxu0 %v199
  %3456 = vmatprep.subr.mxu0 %v198
  %3457 = vmatpush1.msra.mxu0 %v197
  %3458 = vmatprep.subr.mxu0 %v196
  %3459 = vmatpush1.msra.mxu0 %v195
  %3460 = vmatprep.subr.mxu0 %v194
  %3461 = vmatpush1.msra.mxu0 %v193
  %3462 = vmatprep.subr.mxu0 %v192
  %3463 = vmatpush1.msra.mxu0 %v191
  %3464 = vmatprep.subr.mxu0 %v190
  %3465 = vmatpush1.msra.mxu0 %v189
  %3466 = vmatprep.subr.mxu0 %v188
  %3467 = vmatpush1.msra.mxu0 %v187
  %3468 = vmatprep.subr.mxu0 %v186
  %3469 = vmatpush1.msra.mxu0 %v185
  %3470 = vmatprep.subr.mxu0 %v184
  %3471 = vmatpush1.msra.mxu0 %v183
  %3472 = vmatprep.subr.mxu0 %v182
  %3473 = vmatpush1.msra.mxu0 %v181
  %3474 = vmatprep.subr.mxu0 %v180
  %3475 = vmatpush1.msra.mxu0 %v179
  %3476 = vmatprep.subr.mxu0 %v178
  %3477 = vmatpush1.msra.mxu0 %v177
  %3478 = vmatprep.subr.mxu0 %v176
  %3479 = vmatpush1.msra.mxu0 %v175
  %3480 = vmatprep.subr.mxu0 %v174
  %3481 = vmatpush1.msra.mxu0 %v173
  %3482 = vmatprep.subr.mxu0 %v172
  %3483 = vmatpush1.msra.mxu0 %v171
  %3484 = vmatprep.subr.mxu0 %v234
  %3485 = vmatpush2.msra.mxu0 %v233
  %3486 = vmatprep.subr.mxu0 %v232
  %3487 = vmatpush2.msra.mxu0 %v231
  %3488 = vmatprep.subr.mxu0 %v230
  %3489 = vmatpush2.msra.mxu0 %v229
  %3490 = vmatprep.subr.mxu0 %v228
  %3491 = vmatpush2.msra.mxu0 %v227
  %3492 = vmatprep.subr.mxu0 %v226
  %3493 = vmatpush2.msra.mxu0 %v225
  %3494 = vmatprep.subr.mxu0 %v224
  %3495 = vmatpush2.msra.mxu0 %v223
  %3496 = vmatprep.subr.mxu0 %v222
  %3497 = vmatpush2.msra.mxu0 %v221
  %3498 = vmatprep.subr.mxu0 %v220
  %3499 = vmatpush2.msra.mxu0 %v219
  %3500 = vmatprep.subr.mxu0 %v218
  %3501 = vmatpush2.msra.mxu0 %v217
  %3502 = vmatprep.subr.mxu0 %v216
  %3503 = vmatpush2.msra.mxu0 %v215
  %3504 = vmatprep.subr.mxu0 %v214
  %3505 = vmatpush2.msra.mxu0 %v213
  %3506 = vmatprep.subr.mxu0 %v212
  %3507 = vmatpush2.msra.mxu0 %v211
  %3508 = vmatprep.subr.mxu0 %v210
  %3509 = vmatpush2.msra.mxu0 %v209
  %3510 = vmatprep.subr.mxu0 %v208
  %3511 = vmatpush2.msra.mxu0 %v207
  %3512 = vmatprep.subr.mxu0 %v206
  %3513 = vmatpush2.msra.mxu0 %v205
  %3514 = vmatprep.subr.mxu0 %v204
  %3515 = vmatpush2.msra.mxu0 %v203
  %3516 = vmatprep.mubr.f32.mxu0 %v3305
  %3517 = vmatmul.mubr.f32.gmra.mxu0 %v3304
  %v3518 = vpop.f32.mrf.mxu0
  %v3519 = vadd.f32 %v3448, %v3518
  %v3520 = vpop.f32.mrf.mxu0
  %v3521 = vadd.f32 %v3450, %v3520
  %3522 = vdwg.mxu0
  %3523 = vmatprep.subr.mxu0 0.0
  %3524 = vmatpush1.msra.mxu0 0.0
  %3525 = vmatprep.subr.mxu0 0.0
  %3526 = vmatpush1.msra.mxu0 0.0
  %3527 = vmatprep.subr.mxu0 0.0
  %3528 = vmatpush1.msra.mxu0 0.0
  %3529 = vmatprep.subr.mxu0 0.0
  %3530 = vmatpush1.msra.mxu0 0.0
  %3531 = vmatprep.subr.mxu0 0.0
  %3532 = vmatpush1.msra.mxu0 0.0
  %3533 = vmatprep.subr.mxu0 0.0
  %3534 = vmatpush1.msra.mxu0 0.0
  %3535 = vmatprep.subr.mxu0 0.0
  %3536 = vmatpush1.msra.mxu0 0.0
  %3537 = vmatprep.subr.mxu0 0.0
  %3538 = vmatpush1.msra.mxu0 0.0
  %3539 = vmatprep.subr.mxu0 0.0
  %3540 = vmatpush1.msra.mxu0 0.0
  %3541 = vmatprep.subr.mxu0 0.0
  %3542 = vmatpush1.msra.mxu0 0.0
  %3543 = vmatprep.subr.mxu0 0.0
  %3544 = vmatpush1.msra.mxu0 0.0
  %3545 = vmatprep.subr.mxu0 0.0
  %3546 = vmatpush1.msra.mxu0 0.0
  %3547 = vmatprep.subr.mxu0 0.0
  %3548 = vmatpush1.msra.mxu0 0.0
  %3549 = vmatprep.subr.mxu0 0.0
  %3550 = vmatpush1.msra.mxu0 0.0
  %3551 = vmatprep.subr.mxu0 %v238
  %3552 = vmatpush1.msra.mxu0 %v237
  %3553 = vmatprep.subr.mxu0 %v236
  %3554 = vmatpush1.msra.mxu0 %v235
  %3555 = vmatprep.subr.mxu0 0.0
  %3556 = vmatpush2.msra.mxu0 0.0
  %3557 = vmatprep.subr.mxu0 0.0
  %3558 = vmatpush2.msra.mxu0 0.0
  %3559 = vmatprep.subr.mxu0 0.0
  %3560 = vmatpush2.msra.mxu0 0.0
  %3561 = vmatprep.subr.mxu0 0.0
  %3562 = vmatpush2.msra.mxu0 0.0
  %3563 = vmatprep.subr.mxu0 0.0
  %3564 = vmatpush2.msra.mxu0 0.0
  %3565 = vmatprep.subr.mxu0 0.0
  %3566 = vmatpush2.msra.mxu0 0.0
  %3567 = vmatprep.subr.mxu0 0.0
  %3568 = vmatpush2.msra.mxu0 0.0
  %3569 = vmatprep.subr.mxu0 0.0
  %3570 = vmatpush2.msra.mxu0 0.0
  %3571 = vmatprep.subr.mxu0 0.0
  %3572 = vmatpush2.msra.mxu0 0.0
  %3573 = vmatprep.subr.mxu0 0.0
  %3574 = vmatpush2.msra.mxu0 0.0
  %3575 = vmatprep.subr.mxu0 0.0
  %3576 = vmatpush2.msra.mxu0 0.0
  %3577 = vmatprep.subr.mxu0 0.0
  %3578 = vmatpush2.msra.mxu0 0.0
  %3579 = vmatprep.subr.mxu0 0.0
  %3580 = vmatpush2.msra.mxu0 0.0
  %3581 = vmatprep.subr.mxu0 0.0
  %3582 = vmatpush2.msra.mxu0 0.0
  %3583 = vmatprep.subr.mxu0 0.0
  %3584 = vmatpush2.msra.mxu0 0.0
  %3585 = vmatprep.subr.mxu0 0.0
  %3586 = vmatpush2.msra.mxu0 0.0
  %3587 = vmatprep.mubr.f32.mxu0 0.0
  %3588 = vmatmul.mubr.f32.gmra.mxu0 %v3308
  %v3589 = vpop.f32.mrf.mxu0
  %v3590 = vadd.f32 %v3519, %v3589
  %v3591 = vpop.f32.mrf.mxu0
  %v3592 = vadd.f32 %v3521, %v3591
  %3593 = vdwg.mxu0
  %s3594 = scalar_lea.vmem %s0, 2800
  %v3595 = vld [vmem:[%s3594] sm:$0xff]
  %v3596 = vld [vmem:[%s3594 + $0x8] sm:$0xff]
  %v3597 = vld [vmem:[%s3594 + $0x10] sm:$0xff]
  %v3598 = vld [vmem:[%s3594 + $0x18] sm:$0xff]
  %v3599 = vld [vmem:[%s3594 + $0x20] sm:$0xff]
  %v3600 = vld [vmem:[%s3594 + $0x28] sm:$0xff]
  %v3601 = vld [vmem:[%s3594 + $0x30] sm:$0xff]
  %v3602 = vld [vmem:[%s3594 + $0x38] sm:$0xff]
  %v3603 = vld [vmem:[%s3594 + $0x40] sm:$0xff]
  %v3604 = vld [vmem:[%s3594 + $0x48] sm:$0xff]
  %v3605 = vld [vmem:[%s3594 + $0x50] sm:$0xff]
  %v3606 = vld [vmem:[%s3594 + $0x58] sm:$0xff]
  %v3607 = vld [vmem:[%s3594 + $0x60] sm:$0xff]
  %v3608 = vld [vmem:[%s3594 + $0x68] sm:$0xff]
  %v3609 = vld [vmem:[%s3594 + $0x70] sm:$0xff]
  %v3610 = vld [vmem:[%s3594 + $0x78] sm:$0xff]
  %v3611 = vld [vmem:[%s3594 + $0x80] sm:$0xff]
  %v3612 = vld [vmem:[%s3594 + $0x88] sm:$0xff]
  %v3613 = vld [vmem:[%s3594 + $0x90] sm:$0xff]
  %v3614 = vld [vmem:[%s3594 + $0x98] sm:$0xff]
  %v3615 = vld [vmem:[%s3594 + $0xa0] sm:$0xff]
  %v3616 = vld [vmem:[%s3594 + $0xa8] sm:$0xff]
  %v3617 = vld [vmem:[%s3594 + $0xb0] sm:$0xff]
  %v3618 = vld [vmem:[%s3594 + $0xb8] sm:$0xff]
  %v3619 = vld [vmem:[%s3594 + $0xc0] sm:$0xff]
  %v3620 = vld [vmem:[%s3594 + $0xc8] sm:$0xff]
  %v3621 = vld [vmem:[%s3594 + $0xd0] sm:$0xff]
  %v3622 = vld [vmem:[%s3594 + $0xd8] sm:$0xff]
  %v3623 = vld [vmem:[%s3594 + $0xe0] sm:$0xff]
  %v3624 = vld [vmem:[%s3594 + $0xe8] sm:$0xff]
  %v3625 = vld [vmem:[%s3594 + $0xf0] sm:$0xff]
  %v3626 = vld [vmem:[%s3594 + $0xf8] sm:$0xff]
  %v3627 = vld [vmem:[%s3594 + $0x100] sm:$0xff]
  %v3628 = vld [vmem:[%s3594 + $0x108] sm:$0xff]
  %v3629 = vld [vmem:[%s3594 + $0x110] sm:$0xff]
  %v3630 = vld [vmem:[%s3594 + $0x118] sm:$0xff]
  %v3631 = vld [vmem:[%s3594 + $0x120] sm:$0xff]
  %v3632 = vld [vmem:[%s3594 + $0x128] sm:$0xff]
  %v3633 = vld [vmem:[%s3594 + $0x130] sm:$0xff]
  %v3634 = vld [vmem:[%s3594 + $0x138] sm:$0xff]
  %v3635 = vld [vmem:[%s3594 + $0x140] sm:$0xff]
  %v3636 = vld [vmem:[%s3594 + $0x148] sm:$0xff]
  %v3637 = vld [vmem:[%s3594 + $0x150] sm:$0xff]
  %v3638 = vld [vmem:[%s3594 + $0x158] sm:$0xff]
  %v3639 = vld [vmem:[%s3594 + $0x160] sm:$0xff]
  %v3640 = vld [vmem:[%s3594 + $0x168] sm:$0xff]
  %v3641 = vld [vmem:[%s3594 + $0x170] sm:$0xff]
  %v3642 = vld [vmem:[%s3594 + $0x178] sm:$0xff]
  %v3643 = vld [vmem:[%s3594 + $0x180] sm:$0xff]
  %v3644 = vld [vmem:[%s3594 + $0x188] sm:$0xff]
  %v3645 = vld [vmem:[%s3594 + $0x190] sm:$0xff]
  %v3646 = vld [vmem:[%s3594 + $0x198] sm:$0xff]
  %v3647 = vld [vmem:[%s3594 + $0x1a0] sm:$0xff]
  %v3648 = vld [vmem:[%s3594 + $0x1a8] sm:$0xff]
  %v3649 = vld [vmem:[%s3594 + $0x1b0] sm:$0xff]
  %v3650 = vld [vmem:[%s3594 + $0x1b8] sm:$0xff]
  %v3651 = vld [vmem:[%s3594 + $0x1c0] sm:$0xff]
  %v3652 = vld [vmem:[%s3594 + $0x1c8] sm:$0xff]
  %v3653 = vld [vmem:[%s3594 + $0x1d0] sm:$0xff]
  %v3654 = vld [vmem:[%s3594 + $0x1d8] sm:$0xff]
  %v3655 = vld [vmem:[%s3594 + $0x1e0] sm:$0xff]
  %v3656 = vld [vmem:[%s3594 + $0x1e8] sm:$0xff]
  %v3657 = vld [vmem:[%s3594 + $0x1f0] sm:$0xff]
  %v3658 = vld [vmem:[%s3594 + $0x1f8] sm:$0x7]
  %v3659 = vld [vmem:[%s3594 + $0x200] sm:$0x7]
  %v3660 = vld [vmem:[%s3594 + $0x208] sm:$0x7]
  %v3661 = vld [vmem:[%s3594 + $0x210] sm:$0x7]
  %v3662 = vld [vmem:[%s3594 + $0x218] sm:$0x7]
  %v3663 = vld [vmem:[%s3594 + $0x220] sm:$0x7]
  %v3664 = vld [vmem:[%s3594 + $0x228] sm:$0x7]
  %v3666 = vsel %vm318, %v3658, 0
  %v3669 = vsel %vm318, %v3659, 0
  %v3672 = vsel %vm318, %v3660, 0
  %v3675 = vsel %vm318, %v3661, 0
  %v3678 = vsel %vm318, %v3662, 0
  %v3681 = vsel %vm318, %v3663, 0
  %v3684 = vsel %vm318, %v3664, 0
  %3686 = vmatprep.subr.mxu0 0.0
  %3687 = vmatpush1.msra.mxu0 0.0
  %3688 = vmatprep.subr.mxu0 0.0
  %3689 = vmatpush1.msra.mxu0 0.0
  %3690 = vmatprep.subr.mxu0 0.0
  %3691 = vmatpush1.msra.mxu0 0.0
  %3692 = vmatprep.subr.mxu0 0.0
  %3693 = vmatpush1.msra.mxu0 0.0
  %3694 = vmatprep.subr.mxu0 0.0
  %3695 = vmatpush1.msra.mxu0 0.0
  %3696 = vmatprep.subr.mxu0 0.0
  %3697 = vmatpush1.msra.mxu0 0.0
  %3698 = vmatprep.subr.mxu0 %v3669
  %3699 = vmatpush1.msra.mxu0 %v3666
  %3700 = vmatprep.subr.mxu0 %v3652
  %3701 = vmatpush1.msra.mxu0 %v3651
  %3702 = vmatprep.subr.mxu0 %v3645
  %3703 = vmatpush1.msra.mxu0 %v3644
  %3704 = vmatprep.subr.mxu0 %v3638
  %3705 = vmatpush1.msra.mxu0 %v3637
  %3706 = vmatprep.subr.mxu0 %v3631
  %3707 = vmatpush1.msra.mxu0 %v3630
  %3708 = vmatprep.subr.mxu0 %v3624
  %3709 = vmatpush1.msra.mxu0 %v3623
  %3710 = vmatprep.subr.mxu0 %v3617
  %3711 = vmatpush1.msra.mxu0 %v3616
  %3712 = vmatprep.subr.mxu0 %v3610
  %3713 = vmatpush1.msra.mxu0 %v3609
  %3714 = vmatprep.subr.mxu0 %v3603
  %3715 = vmatpush1.msra.mxu0 %v3602
  %3716 = vmatprep.subr.mxu0 %v3596
  %3717 = vmatpush1.msra.mxu0 %v3595
  %3718 = vmatprep.subr.mxu0 0.0
  %3719 = vmatpush2.msra.mxu0 0.0
  %3720 = vmatprep.subr.mxu0 0.0
  %3721 = vmatpush2.msra.mxu0 0.0
  %3722 = vmatprep.subr.mxu0 0.0
  %3723 = vmatpush2.msra.mxu0 0.0
  %3724 = vmatprep.subr.mxu0 0.0
  %3725 = vmatpush2.msra.mxu0 0.0
  %3726 = vmatprep.subr.mxu0 0.0
  %3727 = vmatpush2.msra.mxu0 0.0
  %3728 = vmatprep.subr.mxu0 0.0
  %3729 = vmatpush2.msra.mxu0 0.0
  %3730 = vmatprep.subr.mxu0 0.0
  %3731 = vmatpush2.msra.mxu0 0.0
  %3732 = vmatprep.subr.mxu0 0.0
  %3733 = vmatpush2.msra.mxu0 0.0
  %3734 = vmatprep.subr.mxu0 0.0
  %3735 = vmatpush2.msra.mxu0 0.0
  %3736 = vmatprep.subr.mxu0 0.0
  %3737 = vmatpush2.msra.mxu0 0.0
  %3738 = vmatprep.subr.mxu0 0.0
  %3739 = vmatpush2.msra.mxu0 0.0
  %3740 = vmatprep.subr.mxu0 0.0
  %3741 = vmatpush2.msra.mxu0 0.0
  %3742 = vmatprep.subr.mxu0 0.0
  %3743 = vmatpush2.msra.mxu0 0.0
  %3744 = vmatprep.subr.mxu0 0.0
  %3745 = vmatpush2.msra.mxu0 0.0
  %3746 = vmatprep.subr.mxu0 0.0
  %3747 = vmatpush2.msra.mxu0 0.0
  %3748 = vmatprep.subr.mxu0 0.0
  %3749 = vmatpush2.msra.mxu0 0.0
  %3750 = vmatprep.mubr.f32.mxu0 0.0
  %3751 = vmatmul.mubr.f32.gmra.mxu0 %v316
  %v3752 = vpop.f32.mrf.mxu0
  %v3753 = vadd.f32 %v312, %v3752
  %v3754 = vpop.f32.mrf.mxu0
  %v3755 = vadd.f32 %v312, %v3754
  %3756 = vdwg.mxu0
  %3757 = vmatprep.subr.mxu0 0.0
  %3758 = vmatpush1.msra.mxu0 0.0
  %3759 = vmatprep.subr.mxu0 0.0
  %3760 = vmatpush1.msra.mxu0 0.0
  %3761 = vmatprep.subr.mxu0 0.0
  %3762 = vmatpush1.msra.mxu0 0.0
  %3763 = vmatprep.subr.mxu0 0.0
  %3764 = vmatpush1.msra.mxu0 0.0
  %3765 = vmatprep.subr.mxu0 0.0
  %3766 = vmatpush1.msra.mxu0 0.0
  %3767 = vmatprep.subr.mxu0 0.0
  %3768 = vmatpush1.msra.mxu0 0.0
  %3769 = vmatprep.subr.mxu0 %v3675
  %3770 = vmatpush1.msra.mxu0 %v3672
  %3771 = vmatprep.subr.mxu0 %v3654
  %3772 = vmatpush1.msra.mxu0 %v3653
  %3773 = vmatprep.subr.mxu0 %v3647
  %3774 = vmatpush1.msra.mxu0 %v3646
  %3775 = vmatprep.subr.mxu0 %v3640
  %3776 = vmatpush1.msra.mxu0 %v3639
  %3777 = vmatprep.subr.mxu0 %v3633
  %3778 = vmatpush1.msra.mxu0 %v3632
  %3779 = vmatprep.subr.mxu0 %v3626
  %3780 = vmatpush1.msra.mxu0 %v3625
  %3781 = vmatprep.subr.mxu0 %v3619
  %3782 = vmatpush1.msra.mxu0 %v3618
  %3783 = vmatprep.subr.mxu0 %v3612
  %3784 = vmatpush1.msra.mxu0 %v3611
  %3785 = vmatprep.subr.mxu0 %v3605
  %3786 = vmatpush1.msra.mxu0 %v3604
  %3787 = vmatprep.subr.mxu0 %v3598
  %3788 = vmatpush1.msra.mxu0 %v3597
  %3789 = vmatprep.subr.mxu0 0.0
  %3790 = vmatpush2.msra.mxu0 0.0
  %3791 = vmatprep.subr.mxu0 0.0
  %3792 = vmatpush2.msra.mxu0 0.0
  %3793 = vmatprep.subr.mxu0 0.0
  %3794 = vmatpush2.msra.mxu0 0.0
  %3795 = vmatprep.subr.mxu0 0.0
  %3796 = vmatpush2.msra.mxu0 0.0
  %3797 = vmatprep.subr.mxu0 0.0
  %3798 = vmatpush2.msra.mxu0 0.0
  %3799 = vmatprep.subr.mxu0 0.0
  %3800 = vmatpush2.msra.mxu0 0.0
  %3801 = vmatprep.subr.mxu0 0.0
  %3802 = vmatpush2.msra.mxu0 0.0
  %3803 = vmatprep.subr.mxu0 0.0
  %3804 = vmatpush2.msra.mxu0 0.0
  %3805 = vmatprep.subr.mxu0 0.0
  %3806 = vmatpush2.msra.mxu0 0.0
  %3807 = vmatprep.subr.mxu0 0.0
  %3808 = vmatpush2.msra.mxu0 0.0
  %3809 = vmatprep.subr.mxu0 0.0
  %3810 = vmatpush2.msra.mxu0 0.0
  %3811 = vmatprep.subr.mxu0 0.0
  %3812 = vmatpush2.msra.mxu0 0.0
  %3813 = vmatprep.subr.mxu0 0.0
  %3814 = vmatpush2.msra.mxu0 0.0
  %3815 = vmatprep.subr.mxu0 0.0
  %3816 = vmatpush2.msra.mxu0 0.0
  %3817 = vmatprep.subr.mxu0 0.0
  %3818 = vmatpush2.msra.mxu0 0.0
  %3819 = vmatprep.subr.mxu0 0.0
  %3820 = vmatpush2.msra.mxu0 0.0
  %3821 = vmatprep.mubr.f32.mxu0 0.0
  %3822 = vmatmul.mubr.f32.gmra.mxu0 %v316
  %v3823 = vpop.f32.mrf.mxu0
  %v3824 = vadd.f32 %v312, %v3823
  %v3825 = vpop.f32.mrf.mxu0
  %v3826 = vadd.f32 %v312, %v3825
  %3827 = vdwg.mxu0
  %3828 = vmatprep.subr.mxu0 0.0
  %3829 = vmatpush1.msra.mxu0 0.0
  %3830 = vmatprep.subr.mxu0 0.0
  %3831 = vmatpush1.msra.mxu0 0.0
  %3832 = vmatprep.subr.mxu0 0.0
  %3833 = vmatpush1.msra.mxu0 0.0
  %3834 = vmatprep.subr.mxu0 0.0
  %3835 = vmatpush1.msra.mxu0 0.0
  %3836 = vmatprep.subr.mxu0 0.0
  %3837 = vmatpush1.msra.mxu0 0.0
  %3838 = vmatprep.subr.mxu0 0.0
  %3839 = vmatpush1.msra.mxu0 0.0
  %3840 = vmatprep.subr.mxu0 %v3681
  %3841 = vmatpush1.msra.mxu0 %v3678
  %3842 = vmatprep.subr.mxu0 %v3656
  %3843 = vmatpush1.msra.mxu0 %v3655
  %3844 = vmatprep.subr.mxu0 %v3649
  %3845 = vmatpush1.msra.mxu0 %v3648
  %3846 = vmatprep.subr.mxu0 %v3642
  %3847 = vmatpush1.msra.mxu0 %v3641
  %3848 = vmatprep.subr.mxu0 %v3635
  %3849 = vmatpush1.msra.mxu0 %v3634
  %3850 = vmatprep.subr.mxu0 %v3628
  %3851 = vmatpush1.msra.mxu0 %v3627
  %3852 = vmatprep.subr.mxu0 %v3621
  %3853 = vmatpush1.msra.mxu0 %v3620
  %3854 = vmatprep.subr.mxu0 %v3614
  %3855 = vmatpush1.msra.mxu0 %v3613
  %3856 = vmatprep.subr.mxu0 %v3607
  %3857 = vmatpush1.msra.mxu0 %v3606
  %3858 = vmatprep.subr.mxu0 %v3600
  %3859 = vmatpush1.msra.mxu0 %v3599
  %3860 = vmatprep.subr.mxu0 0.0
  %3861 = vmatpush2.msra.mxu0 0.0
  %3862 = vmatprep.subr.mxu0 0.0
  %3863 = vmatpush2.msra.mxu0 0.0
  %3864 = vmatprep.subr.mxu0 0.0
  %3865 = vmatpush2.msra.mxu0 0.0
  %3866 = vmatprep.subr.mxu0 0.0
  %3867 = vmatpush2.msra.mxu0 0.0
  %3868 = vmatprep.subr.mxu0 0.0
  %3869 = vmatpush2.msra.mxu0 0.0
  %3870 = vmatprep.subr.mxu0 0.0
  %3871 = vmatpush2.msra.mxu0 0.0
  %3872 = vmatprep.subr.mxu0 0.0
  %3873 = vmatpush2.msra.mxu0 0.0
  %3874 = vmatprep.subr.mxu0 0.0
  %3875 = vmatpush2.msra.mxu0 0.0
  %3876 = vmatprep.subr.mxu0 0.0
  %3877 = vmatpush2.msra.mxu0 0.0
  %3878 = vmatprep.subr.mxu0 0.0
  %3879 = vmatpush2.msra.mxu0 0.0
  %3880 = vmatprep.subr.mxu0 0.0
  %3881 = vmatpush2.msra.mxu0 0.0
  %3882 = vmatprep.subr.mxu0 0.0
  %3883 = vmatpush2.msra.mxu0 0.0
  %3884 = vmatprep.subr.mxu0 0.0
  %3885 = vmatpush2.msra.mxu0 0.0
  %3886 = vmatprep.subr.mxu0 0.0
  %3887 = vmatpush2.msra.mxu0 0.0
  %3888 = vmatprep.subr.mxu0 0.0
  %3889 = vmatpush2.msra.mxu0 0.0
  %3890 = vmatprep.subr.mxu0 0.0
  %3891 = vmatpush2.msra.mxu0 0.0
  %3892 = vmatprep.mubr.f32.mxu0 0.0
  %3893 = vmatmul.mubr.f32.gmra.mxu0 %v316
  %v3894 = vpop.f32.mrf.mxu0
  %v3895 = vadd.f32 %v312, %v3894
  %v3896 = vpop.f32.mrf.mxu0
  %v3897 = vadd.f32 %v312, %v3896
  %3898 = vdwg.mxu0
  %3899 = vmatprep.subr.mxu0 0.0
  %3900 = vmatpush1.msra.mxu0 0.0
  %3901 = vmatprep.subr.mxu0 0.0
  %3902 = vmatpush1.msra.mxu0 0.0
  %3903 = vmatprep.subr.mxu0 0.0
  %3904 = vmatpush1.msra.mxu0 0.0
  %3905 = vmatprep.subr.mxu0 0.0
  %3906 = vmatpush1.msra.mxu0 0.0
  %3907 = vmatprep.subr.mxu0 0.0
  %3908 = vmatpush1.msra.mxu0 0.0
  %3909 = vmatprep.subr.mxu0 0.0
  %3910 = vmatpush1.msra.mxu0 0.0
  %3911 = vmatprep.subr.mxu0 0.0
  %3912 = vmatpush1.msra.mxu0 %v3684
  %3913 = vmatprep.subr.mxu0 0.0
  %3914 = vmatpush1.msra.mxu0 %v3657
  %3915 = vmatprep.subr.mxu0 0.0
  %3916 = vmatpush1.msra.mxu0 %v3650
  %3917 = vmatprep.subr.mxu0 0.0
  %3918 = vmatpush1.msra.mxu0 %v3643
  %3919 = vmatprep.subr.mxu0 0.0
  %3920 = vmatpush1.msra.mxu0 %v3636
  %3921 = vmatprep.subr.mxu0 0.0
  %3922 = vmatpush1.msra.mxu0 %v3629
  %3923 = vmatprep.subr.mxu0 0.0
  %3924 = vmatpush1.msra.mxu0 %v3622
  %3925 = vmatprep.subr.mxu0 0.0
  %3926 = vmatpush1.msra.mxu0 %v3615
  %3927 = vmatprep.subr.mxu0 0.0
  %3928 = vmatpush1.msra.mxu0 %v3608
  %3929 = vmatprep.subr.mxu0 0.0
  %3930 = vmatpush1.msra.mxu0 %v3601
  %3931 = vmatprep.subr.mxu0 0.0
  %3932 = vmatpush2.msra.mxu0 0.0
  %3933 = vmatprep.subr.mxu0 0.0
  %3934 = vmatpush2.msra.mxu0 0.0
  %3935 = vmatprep.subr.mxu0 0.0
  %3936 = vmatpush2.msra.mxu0 0.0
  %3937 = vmatprep.subr.mxu0 0.0
  %3938 = vmatpush2.msra.mxu0 0.0
  %3939 = vmatprep.subr.mxu0 0.0
  %3940 = vmatpush2.msra.mxu0 0.0
  %3941 = vmatprep.subr.mxu0 0.0
  %3942 = vmatpush2.msra.mxu0 0.0
  %3943 = vmatprep.subr.mxu0 0.0
  %3944 = vmatpush2.msra.mxu0 0.0
  %3945 = vmatprep.subr.mxu0 0.0
  %3946 = vmatpush2.msra.mxu0 0.0
  %3947 = vmatprep.subr.mxu0 0.0
  %3948 = vmatpush2.msra.mxu0 0.0
  %3949 = vmatprep.subr.mxu0 0.0
  %3950 = vmatpush2.msra.mxu0 0.0
  %3951 = vmatprep.subr.mxu0 0.0
  %3952 = vmatpush2.msra.mxu0 0.0
  %3953 = vmatprep.subr.mxu0 0.0
  %3954 = vmatpush2.msra.mxu0 0.0
  %3955 = vmatprep.subr.mxu0 0.0
  %3956 = vmatpush2.msra.mxu0 0.0
  %3957 = vmatprep.subr.mxu0 0.0
  %3958 = vmatpush2.msra.mxu0 0.0
  %3959 = vmatprep.subr.mxu0 0.0
  %3960 = vmatpush2.msra.mxu0 0.0
  %3961 = vmatprep.subr.mxu0 0.0
  %3962 = vmatpush2.msra.mxu0 0.0
  %3963 = vmatprep.mubr.f32.mxu0 0.0
  %3964 = vmatmul.mubr.f32.gmra.mxu0 %v316
  %v3965 = vpop.f32.mrf.mxu0
  %v3966 = vadd.f32 %v312, %v3965
  %v3967 = vpop.f32.mrf.mxu0
  %3968 = vdwg.mxu0
  %v3969 = vtanh.pop %v3753
  %v3970 = vtanh.pop %v3755
  %v3971 = vtanh.pop %v3824
  %v3972 = vtanh.pop %v3826
  %v3973 = vtanh.pop %v3895
  %v3974 = vtanh.pop %v3897
  %v3975 = vtanh.pop %v3966
  %v3977 = vsel %vm630, %v3975, 0
  %3979 = vmatprep.subr.mxu0 %v74
  %3980 = vmatpush1.msra.mxu0 %v73
  %3981 = vmatprep.subr.mxu0 %v72
  %3982 = vmatpush1.msra.mxu0 %v71
  %3983 = vmatprep.subr.mxu0 %v70
  %3984 = vmatpush1.msra.mxu0 %v69
  %3985 = vmatprep.subr.mxu0 %v68
  %3986 = vmatpush1.msra.mxu0 %v67
  %3987 = vmatprep.subr.mxu0 %v66
  %3988 = vmatpush1.msra.mxu0 %v65
  %3989 = vmatprep.subr.mxu0 %v64
  %3990 = vmatpush1.msra.mxu0 %v63
  %3991 = vmatprep.subr.mxu0 %v62
  %3992 = vmatpush1.msra.mxu0 %v61
  %3993 = vmatprep.subr.mxu0 %v60
  %3994 = vmatpush1.msra.mxu0 %v59
  %3995 = vmatprep.subr.mxu0 %v58
  %3996 = vmatpush1.msra.mxu0 %v57
  %3997 = vmatprep.subr.mxu0 %v56
  %3998 = vmatpush1.msra.mxu0 %v55
  %3999 = vmatprep.subr.mxu0 %v54
  %4000 = vmatpush1.msra.mxu0 %v53
  %4001 = vmatprep.subr.mxu0 %v52
  %4002 = vmatpush1.msra.mxu0 %v51
  %4003 = vmatprep.subr.mxu0 %v50
  %4004 = vmatpush1.msra.mxu0 %v49
  %4005 = vmatprep.subr.mxu0 %v48
  %4006 = vmatpush1.msra.mxu0 %v47
  %4007 = vmatprep.subr.mxu0 %v46
  %4008 = vmatpush1.msra.mxu0 %v45
  %4009 = vmatprep.subr.mxu0 %v44
  %4010 = vmatpush1.msra.mxu0 %v43
  %4011 = vmatprep.subr.mxu0 %v106
  %4012 = vmatpush2.msra.mxu0 %v105
  %4013 = vmatprep.subr.mxu0 %v104
  %4014 = vmatpush2.msra.mxu0 %v103
  %4015 = vmatprep.subr.mxu0 %v102
  %4016 = vmatpush2.msra.mxu0 %v101
  %4017 = vmatprep.subr.mxu0 %v100
  %4018 = vmatpush2.msra.mxu0 %v99
  %4019 = vmatprep.subr.mxu0 %v98
  %4020 = vmatpush2.msra.mxu0 %v97
  %4021 = vmatprep.subr.mxu0 %v96
  %4022 = vmatpush2.msra.mxu0 %v95
  %4023 = vmatprep.subr.mxu0 %v94
  %4024 = vmatpush2.msra.mxu0 %v93
  %4025 = vmatprep.subr.mxu0 %v92
  %4026 = vmatpush2.msra.mxu0 %v91
  %4027 = vmatprep.subr.mxu0 %v90
  %4028 = vmatpush2.msra.mxu0 %v89
  %4029 = vmatprep.subr.mxu0 %v88
  %4030 = vmatpush2.msra.mxu0 %v87
  %4031 = vmatprep.subr.mxu0 %v86
  %4032 = vmatpush2.msra.mxu0 %v85
  %4033 = vmatprep.subr.mxu0 %v84
  %4034 = vmatpush2.msra.mxu0 %v83
  %4035 = vmatprep.subr.mxu0 %v82
  %4036 = vmatpush2.msra.mxu0 %v81
  %4037 = vmatprep.subr.mxu0 %v80
  %4038 = vmatpush2.msra.mxu0 %v79
  %4039 = vmatprep.subr.mxu0 %v78
  %4040 = vmatpush2.msra.mxu0 %v77
  %4041 = vmatprep.subr.mxu0 %v76
  %4042 = vmatpush2.msra.mxu0 %v75
  %4043 = vmatprep.mubr.f32.mxu0 %v3970
  %4044 = vmatmul.mubr.f32.gmra.mxu0 %v3969
  %v4045 = vpop.f32.mrf.mxu0
  %v4046 = vadd.f32 0.0, %v4045
  %v4047 = vpop.f32.mrf.mxu0
  %v4048 = vadd.f32 0.0, %v4047
  %4049 = vdwg.mxu0
  %4050 = vmatprep.subr.mxu0 %v138
  %4051 = vmatpush1.msra.mxu0 %v137
  %4052 = vmatprep.subr.mxu0 %v136
  %4053 = vmatpush1.msra.mxu0 %v135
  %4054 = vmatprep.subr.mxu0 %v134
  %4055 = vmatpush1.msra.mxu0 %v133
  %4056 = vmatprep.subr.mxu0 %v132
  %4057 = vmatpush1.msra.mxu0 %v131
  %4058 = vmatprep.subr.mxu0 %v130
  %4059 = vmatpush1.msra.mxu0 %v129
  %4060 = vmatprep.subr.mxu0 %v128
  %4061 = vmatpush1.msra.mxu0 %v127
  %4062 = vmatprep.subr.mxu0 %v126
  %4063 = vmatpush1.msra.mxu0 %v125
  %4064 = vmatprep.subr.mxu0 %v124
  %4065 = vmatpush1.msra.mxu0 %v123
  %4066 = vmatprep.subr.mxu0 %v122
  %4067 = vmatpush1.msra.mxu0 %v121
  %4068 = vmatprep.subr.mxu0 %v120
  %4069 = vmatpush1.msra.mxu0 %v119
  %4070 = vmatprep.subr.mxu0 %v118
  %4071 = vmatpush1.msra.mxu0 %v117
  %4072 = vmatprep.subr.mxu0 %v116
  %4073 = vmatpush1.msra.mxu0 %v115
  %4074 = vmatprep.subr.mxu0 %v114
  %4075 = vmatpush1.msra.mxu0 %v113
  %4076 = vmatprep.subr.mxu0 %v112
  %4077 = vmatpush1.msra.mxu0 %v111
  %4078 = vmatprep.subr.mxu0 %v110
  %4079 = vmatpush1.msra.mxu0 %v109
  %4080 = vmatprep.subr.mxu0 %v108
  %4081 = vmatpush1.msra.mxu0 %v107
  %4082 = vmatprep.subr.mxu0 %v170
  %4083 = vmatpush2.msra.mxu0 %v169
  %4084 = vmatprep.subr.mxu0 %v168
  %4085 = vmatpush2.msra.mxu0 %v167
  %4086 = vmatprep.subr.mxu0 %v166
  %4087 = vmatpush2.msra.mxu0 %v165
  %4088 = vmatprep.subr.mxu0 %v164
  %4089 = vmatpush2.msra.mxu0 %v163
  %4090 = vmatprep.subr.mxu0 %v162
  %4091 = vmatpush2.msra.mxu0 %v161
  %4092 = vmatprep.subr.mxu0 %v160
  %4093 = vmatpush2.msra.mxu0 %v159
  %4094 = vmatprep.subr.mxu0 %v158
  %4095 = vmatpush2.msra.mxu0 %v157
  %4096 = vmatprep.subr.mxu0 %v156
  %4097 = vmatpush2.msra.mxu0 %v155
  %4098 = vmatprep.subr.mxu0 %v154
  %4099 = vmatpush2.msra.mxu0 %v153
  %4100 = vmatprep.subr.mxu0 %v152
  %4101 = vmatpush2.msra.mxu0 %v151
  %4102 = vmatprep.subr.mxu0 %v150
  %4103 = vmatpush2.msra.mxu0 %v149
  %4104 = vmatprep.subr.mxu0 %v148
  %4105 = vmatpush2.msra.mxu0 %v147
  %4106 = vmatprep.subr.mxu0 %v146
  %4107 = vmatpush2.msra.mxu0 %v145
  %4108 = vmatprep.subr.mxu0 %v144
  %4109 = vmatpush2.msra.mxu0 %v143
  %4110 = vmatprep.subr.mxu0 %v142
  %4111 = vmatpush2.msra.mxu0 %v141
  %4112 = vmatprep.subr.mxu0 %v140
  %4113 = vmatpush2.msra.mxu0 %v139
  %4114 = vmatprep.mubr.f32.mxu0 %v3972
  %4115 = vmatmul.mubr.f32.gmra.mxu0 %v3971
  %v4116 = vpop.f32.mrf.mxu0
  %v4117 = vadd.f32 %v4046, %v4116
  %v4118 = vpop.f32.mrf.mxu0
  %v4119 = vadd.f32 %v4048, %v4118
  %4120 = vdwg.mxu0
  %4121 = vmatprep.subr.mxu0 %v202
  %4122 = vmatpush1.msra.mxu0 %v201
  %4123 = vmatprep.subr.mxu0 %v200
  %4124 = vmatpush1.msra.mxu0 %v199
  %4125 = vmatprep.subr.mxu0 %v198
  %4126 = vmatpush1.msra.mxu0 %v197
  %4127 = vmatprep.subr.mxu0 %v196
  %4128 = vmatpush1.msra.mxu0 %v195
  %4129 = vmatprep.subr.mxu0 %v194
  %4130 = vmatpush1.msra.mxu0 %v193
  %4131 = vmatprep.subr.mxu0 %v192
  %4132 = vmatpush1.msra.mxu0 %v191
  %4133 = vmatprep.subr.mxu0 %v190
  %4134 = vmatpush1.msra.mxu0 %v189
  %4135 = vmatprep.subr.mxu0 %v188
  %4136 = vmatpush1.msra.mxu0 %v187
  %4137 = vmatprep.subr.mxu0 %v186
  %4138 = vmatpush1.msra.mxu0 %v185
  %4139 = vmatprep.subr.mxu0 %v184
  %4140 = vmatpush1.msra.mxu0 %v183
  %4141 = vmatprep.subr.mxu0 %v182
  %4142 = vmatpush1.msra.mxu0 %v181
  %4143 = vmatprep.subr.mxu0 %v180
  %4144 = vmatpush1.msra.mxu0 %v179
  %4145 = vmatprep.subr.mxu0 %v178
  %4146 = vmatpush1.msra.mxu0 %v177
  %4147 = vmatprep.subr.mxu0 %v176
  %4148 = vmatpush1.msra.mxu0 %v175
  %4149 = vmatprep.subr.mxu0 %v174
  %4150 = vmatpush1.msra.mxu0 %v173
  %4151 = vmatprep.subr.mxu0 %v172
  %4152 = vmatpush1.msra.mxu0 %v171
  %4153 = vmatprep.subr.mxu0 %v234
  %4154 = vmatpush2.msra.mxu0 %v233
  %4155 = vmatprep.subr.mxu0 %v232
  %4156 = vmatpush2.msra.mxu0 %v231
  %4157 = vmatprep.subr.mxu0 %v230
  %4158 = vmatpush2.msra.mxu0 %v229
  %4159 = vmatprep.subr.mxu0 %v228
  %4160 = vmatpush2.msra.mxu0 %v227
  %4161 = vmatprep.subr.mxu0 %v226
  %4162 = vmatpush2.msra.mxu0 %v225
  %4163 = vmatprep.subr.mxu0 %v224
  %4164 = vmatpush2.msra.mxu0 %v223
  %4165 = vmatprep.subr.mxu0 %v222
  %4166 = vmatpush2.msra.mxu0 %v221
  %4167 = vmatprep.subr.mxu0 %v220
  %4168 = vmatpush2.msra.mxu0 %v219
  %4169 = vmatprep.subr.mxu0 %v218
  %4170 = vmatpush2.msra.mxu0 %v217
  %4171 = vmatprep.subr.mxu0 %v216
  %4172 = vmatpush2.msra.mxu0 %v215
  %4173 = vmatprep.subr.mxu0 %v214
  %4174 = vmatpush2.msra.mxu0 %v213
  %4175 = vmatprep.subr.mxu0 %v212
  %4176 = vmatpush2.msra.mxu0 %v211
  %4177 = vmatprep.subr.mxu0 %v210
  %4178 = vmatpush2.msra.mxu0 %v209
  %4179 = vmatprep.subr.mxu0 %v208
  %4180 = vmatpush2.msra.mxu0 %v207
  %4181 = vmatprep.subr.mxu0 %v206
  %4182 = vmatpush2.msra.mxu0 %v205
  %4183 = vmatprep.subr.mxu0 %v204
  %4184 = vmatpush2.msra.mxu0 %v203
  %4185 = vmatprep.mubr.f32.mxu0 %v3974
  %4186 = vmatmul.mubr.f32.gmra.mxu0 %v3973
  %v4187 = vpop.f32.mrf.mxu0
  %v4188 = vadd.f32 %v4117, %v4187
  %v4189 = vpop.f32.mrf.mxu0
  %v4190 = vadd.f32 %v4119, %v4189
  %4191 = vdwg.mxu0
  %4192 = vmatprep.subr.mxu0 0.0
  %4193 = vmatpush1.msra.mxu0 0.0
  %4194 = vmatprep.subr.mxu0 0.0
  %4195 = vmatpush1.msra.mxu0 0.0
  %4196 = vmatprep.subr.mxu0 0.0
  %4197 = vmatpush1.msra.mxu0 0.0
  %4198 = vmatprep.subr.mxu0 0.0
  %4199 = vmatpush1.msra.mxu0 0.0
  %4200 = vmatprep.subr.mxu0 0.0
  %4201 = vmatpush1.msra.mxu0 0.0
  %4202 = vmatprep.subr.mxu0 0.0
  %4203 = vmatpush1.msra.mxu0 0.0
  %4204 = vmatprep.subr.mxu0 0.0
  %4205 = vmatpush1.msra.mxu0 0.0
  %4206 = vmatprep.subr.mxu0 0.0
  %4207 = vmatpush1.msra.mxu0 0.0
  %4208 = vmatprep.subr.mxu0 0.0
  %4209 = vmatpush1.msra.mxu0 0.0
  %4210 = vmatprep.subr.mxu0 0.0
  %4211 = vmatpush1.msra.mxu0 0.0
  %4212 = vmatprep.subr.mxu0 0.0
  %4213 = vmatpush1.msra.mxu0 0.0
  %4214 = vmatprep.subr.mxu0 0.0
  %4215 = vmatpush1.msra.mxu0 0.0
  %4216 = vmatprep.subr.mxu0 0.0
  %4217 = vmatpush1.msra.mxu0 0.0
  %4218 = vmatprep.subr.mxu0 0.0
  %4219 = vmatpush1.msra.mxu0 0.0
  %4220 = vmatprep.subr.mxu0 %v238
  %4221 = vmatpush1.msra.mxu0 %v237
  %4222 = vmatprep.subr.mxu0 %v236
  %4223 = vmatpush1.msra.mxu0 %v235
  %4224 = vmatprep.subr.mxu0 0.0
  %4225 = vmatpush2.msra.mxu0 0.0
  %4226 = vmatprep.subr.mxu0 0.0
  %4227 = vmatpush2.msra.mxu0 0.0
  %4228 = vmatprep.subr.mxu0 0.0
  %4229 = vmatpush2.msra.mxu0 0.0
  %4230 = vmatprep.subr.mxu0 0.0
  %4231 = vmatpush2.msra.mxu0 0.0
  %4232 = vmatprep.subr.mxu0 0.0
  %4233 = vmatpush2.msra.mxu0 0.0
  %4234 = vmatprep.subr.mxu0 0.0
  %4235 = vmatpush2.msra.mxu0 0.0
  %4236 = vmatprep.subr.mxu0 0.0
  %4237 = vmatpush2.msra.mxu0 0.0
  %4238 = vmatprep.subr.mxu0 0.0
  %4239 = vmatpush2.msra.mxu0 0.0
  %4240 = vmatprep.subr.mxu0 0.0
  %4241 = vmatpush2.msra.mxu0 0.0
  %4242 = vmatprep.subr.mxu0 0.0
  %4243 = vmatpush2.msra.mxu0 0.0
  %4244 = vmatprep.subr.mxu0 0.0
  %4245 = vmatpush2.msra.mxu0 0.0
  %4246 = vmatprep.subr.mxu0 0.0
  %4247 = vmatpush2.msra.mxu0 0.0
  %4248 = vmatprep.subr.mxu0 0.0
  %4249 = vmatpush2.msra.mxu0 0.0
  %4250 = vmatprep.subr.mxu0 0.0
  %4251 = vmatpush2.msra.mxu0 0.0
  %4252 = vmatprep.subr.mxu0 0.0
  %4253 = vmatpush2.msra.mxu0 0.0
  %4254 = vmatprep.subr.mxu0 0.0
  %4255 = vmatpush2.msra.mxu0 0.0
  %4256 = vmatprep.mubr.f32.mxu0 0.0
  %4257 = vmatmul.mubr.f32.gmra.mxu0 %v3977
  %v4258 = vpop.f32.mrf.mxu0
  %v4259 = vadd.f32 %v4188, %v4258
  %v4260 = vpop.f32.mrf.mxu0
  %v4261 = vadd.f32 %v4190, %v4260
  %4262 = vdwg.mxu0
  %s4263 = scalar_lea.vmem %s0, 3360
  %v4264 = vld [vmem:[%s4263] sm:$0xff]
  %v4265 = vld [vmem:[%s4263 + $0x8] sm:$0xff]
  %v4266 = vld [vmem:[%s4263 + $0x10] sm:$0xff]
  %v4267 = vld [vmem:[%s4263 + $0x18] sm:$0xff]
  %v4268 = vld [vmem:[%s4263 + $0x20] sm:$0xff]
  %v4269 = vld [vmem:[%s4263 + $0x28] sm:$0xff]
  %v4270 = vld [vmem:[%s4263 + $0x30] sm:$0xff]
  %v4271 = vld [vmem:[%s4263 + $0x38] sm:$0xff]
  %v4272 = vld [vmem:[%s4263 + $0x40] sm:$0xff]
  %v4273 = vld [vmem:[%s4263 + $0x48] sm:$0xff]
  %v4274 = vld [vmem:[%s4263 + $0x50] sm:$0xff]
  %v4275 = vld [vmem:[%s4263 + $0x58] sm:$0xff]
  %v4276 = vld [vmem:[%s4263 + $0x60] sm:$0xff]
  %v4277 = vld [vmem:[%s4263 + $0x68] sm:$0xff]
  %v4278 = vld [vmem:[%s4263 + $0x70] sm:$0xff]
  %v4279 = vld [vmem:[%s4263 + $0x78] sm:$0xff]
  %v4280 = vld [vmem:[%s4263 + $0x80] sm:$0xff]
  %v4281 = vld [vmem:[%s4263 + $0x88] sm:$0xff]
  %v4282 = vld [vmem:[%s4263 + $0x90] sm:$0xff]
  %v4283 = vld [vmem:[%s4263 + $0x98] sm:$0xff]
  %v4284 = vld [vmem:[%s4263 + $0xa0] sm:$0xff]
  %v4285 = vld [vmem:[%s4263 + $0xa8] sm:$0xff]
  %v4286 = vld [vmem:[%s4263 + $0xb0] sm:$0xff]
  %v4287 = vld [vmem:[%s4263 + $0xb8] sm:$0xff]
  %v4288 = vld [vmem:[%s4263 + $0xc0] sm:$0xff]
  %v4289 = vld [vmem:[%s4263 + $0xc8] sm:$0xff]
  %v4290 = vld [vmem:[%s4263 + $0xd0] sm:$0xff]
  %v4291 = vld [vmem:[%s4263 + $0xd8] sm:$0xff]
  %v4292 = vld [vmem:[%s4263 + $0xe0] sm:$0xff]
  %v4293 = vld [vmem:[%s4263 + $0xe8] sm:$0xff]
  %v4294 = vld [vmem:[%s4263 + $0xf0] sm:$0xff]
  %v4295 = vld [vmem:[%s4263 + $0xf8] sm:$0xff]
  %v4296 = vld [vmem:[%s4263 + $0x100] sm:$0xff]
  %v4297 = vld [vmem:[%s4263 + $0x108] sm:$0xff]
  %v4298 = vld [vmem:[%s4263 + $0x110] sm:$0xff]
  %v4299 = vld [vmem:[%s4263 + $0x118] sm:$0xff]
  %v4300 = vld [vmem:[%s4263 + $0x120] sm:$0xff]
  %v4301 = vld [vmem:[%s4263 + $0x128] sm:$0xff]
  %v4302 = vld [vmem:[%s4263 + $0x130] sm:$0xff]
  %v4303 = vld [vmem:[%s4263 + $0x138] sm:$0xff]
  %v4304 = vld [vmem:[%s4263 + $0x140] sm:$0xff]
  %v4305 = vld [vmem:[%s4263 + $0x148] sm:$0xff]
  %v4306 = vld [vmem:[%s4263 + $0x150] sm:$0xff]
  %v4307 = vld [vmem:[%s4263 + $0x158] sm:$0xff]
  %v4308 = vld [vmem:[%s4263 + $0x160] sm:$0xff]
  %v4309 = vld [vmem:[%s4263 + $0x168] sm:$0xff]
  %v4310 = vld [vmem:[%s4263 + $0x170] sm:$0xff]
  %v4311 = vld [vmem:[%s4263 + $0x178] sm:$0xff]
  %v4312 = vld [vmem:[%s4263 + $0x180] sm:$0xff]
  %v4313 = vld [vmem:[%s4263 + $0x188] sm:$0xff]
  %v4314 = vld [vmem:[%s4263 + $0x190] sm:$0xff]
  %v4315 = vld [vmem:[%s4263 + $0x198] sm:$0xff]
  %v4316 = vld [vmem:[%s4263 + $0x1a0] sm:$0xff]
  %v4317 = vld [vmem:[%s4263 + $0x1a8] sm:$0xff]
  %v4318 = vld [vmem:[%s4263 + $0x1b0] sm:$0xff]
  %v4319 = vld [vmem:[%s4263 + $0x1b8] sm:$0xff]
  %v4320 = vld [vmem:[%s4263 + $0x1c0] sm:$0xff]
  %v4321 = vld [vmem:[%s4263 + $0x1c8] sm:$0xff]
  %v4322 = vld [vmem:[%s4263 + $0x1d0] sm:$0xff]
  %v4323 = vld [vmem:[%s4263 + $0x1d8] sm:$0xff]
  %v4324 = vld [vmem:[%s4263 + $0x1e0] sm:$0xff]
  %v4325 = vld [vmem:[%s4263 + $0x1e8] sm:$0xff]
  %v4326 = vld [vmem:[%s4263 + $0x1f0] sm:$0xff]
  %v4327 = vld [vmem:[%s4263 + $0x1f8] sm:$0x7]
  %v4328 = vld [vmem:[%s4263 + $0x200] sm:$0x7]
  %v4329 = vld [vmem:[%s4263 + $0x208] sm:$0x7]
  %v4330 = vld [vmem:[%s4263 + $0x210] sm:$0x7]
  %v4331 = vld [vmem:[%s4263 + $0x218] sm:$0x7]
  %v4332 = vld [vmem:[%s4263 + $0x220] sm:$0x7]
  %v4333 = vld [vmem:[%s4263 + $0x228] sm:$0x7]
  %v4335 = vsel %vm318, %v4327, 0
  %v4338 = vsel %vm318, %v4328, 0
  %v4341 = vsel %vm318, %v4329, 0
  %v4344 = vsel %vm318, %v4330, 0
  %v4347 = vsel %vm318, %v4331, 0
  %v4350 = vsel %vm318, %v4332, 0
  %v4353 = vsel %vm318, %v4333, 0
  %4355 = vmatprep.subr.mxu0 0.0
  %4356 = vmatpush1.msra.mxu0 0.0
  %4357 = vmatprep.subr.mxu0 0.0
  %4358 = vmatpush1.msra.mxu0 0.0
  %4359 = vmatprep.subr.mxu0 0.0
  %4360 = vmatpush1.msra.mxu0 0.0
  %4361 = vmatprep.subr.mxu0 0.0
  %4362 = vmatpush1.msra.mxu0 0.0
  %4363 = vmatprep.subr.mxu0 0.0
  %4364 = vmatpush1.msra.mxu0 0.0
  %4365 = vmatprep.subr.mxu0 0.0
  %4366 = vmatpush1.msra.mxu0 0.0
  %4367 = vmatprep.subr.mxu0 %v4338
  %4368 = vmatpush1.msra.mxu0 %v4335
  %4369 = vmatprep.subr.mxu0 %v4321
  %4370 = vmatpush1.msra.mxu0 %v4320
  %4371 = vmatprep.subr.mxu0 %v4314
  %4372 = vmatpush1.msra.mxu0 %v4313
  %4373 = vmatprep.subr.mxu0 %v4307
  %4374 = vmatpush1.msra.mxu0 %v4306
  %4375 = vmatprep.subr.mxu0 %v4300
  %4376 = vmatpush1.msra.mxu0 %v4299
  %4377 = vmatprep.subr.mxu0 %v4293
  %4378 = vmatpush1.msra.mxu0 %v4292
  %4379 = vmatprep.subr.mxu0 %v4286
  %4380 = vmatpush1.msra.mxu0 %v4285
  %4381 = vmatprep.subr.mxu0 %v4279
  %4382 = vmatpush1.msra.mxu0 %v4278
  %4383 = vmatprep.subr.mxu0 %v4272
  %4384 = vmatpush1.msra.mxu0 %v4271
  %4385 = vmatprep.subr.mxu0 %v4265
  %4386 = vmatpush1.msra.mxu0 %v4264
  %4387 = vmatprep.subr.mxu0 0.0
  %4388 = vmatpush2.msra.mxu0 0.0
  %4389 = vmatprep.subr.mxu0 0.0
  %4390 = vmatpush2.msra.mxu0 0.0
  %4391 = vmatprep.subr.mxu0 0.0
  %4392 = vmatpush2.msra.mxu0 0.0
  %4393 = vmatprep.subr.mxu0 0.0
  %4394 = vmatpush2.msra.mxu0 0.0
  %4395 = vmatprep.subr.mxu0 0.0
  %4396 = vmatpush2.msra.mxu0 0.0
  %4397 = vmatprep.subr.mxu0 0.0
  %4398 = vmatpush2.msra.mxu0 0.0
  %4399 = vmatprep.subr.mxu0 0.0
  %4400 = vmatpush2.msra.mxu0 0.0
  %4401 = vmatprep.subr.mxu0 0.0
  %4402 = vmatpush2.msra.mxu0 0.0
  %4403 = vmatprep.subr.mxu0 0.0
  %4404 = vmatpush2.msra.mxu0 0.0
  %4405 = vmatprep.subr.mxu0 0.0
  %4406 = vmatpush2.msra.mxu0 0.0
  %4407 = vmatprep.subr.mxu0 0.0
  %4408 = vmatpush2.msra.mxu0 0.0
  %4409 = vmatprep.subr.mxu0 0.0
  %4410 = vmatpush2.msra.mxu0 0.0
  %4411 = vmatprep.subr.mxu0 0.0
  %4412 = vmatpush2.msra.mxu0 0.0
  %4413 = vmatprep.subr.mxu0 0.0
  %4414 = vmatpush2.msra.mxu0 0.0
  %4415 = vmatprep.subr.mxu0 0.0
  %4416 = vmatpush2.msra.mxu0 0.0
  %4417 = vmatprep.subr.mxu0 0.0
  %4418 = vmatpush2.msra.mxu0 0.0
  %4419 = vmatprep.mubr.f32.mxu0 0.0
  %4420 = vmatmul.mubr.f32.gmra.mxu0 %v316
  %v4421 = vpop.f32.mrf.mxu0
  %v4422 = vadd.f32 %v312, %v4421
  %v4423 = vpop.f32.mrf.mxu0
  %v4424 = vadd.f32 %v312, %v4423
  %4425 = vdwg.mxu0
  %4426 = vmatprep.subr.mxu0 0.0
  %4427 = vmatpush1.msra.mxu0 0.0
  %4428 = vmatprep.subr.mxu0 0.0
  %4429 = vmatpush1.msra.mxu0 0.0
  %4430 = vmatprep.subr.mxu0 0.0
  %4431 = vmatpush1.msra.mxu0 0.0
  %4432 = vmatprep.subr.mxu0 0.0
  %4433 = vmatpush1.msra.mxu0 0.0
  %4434 = vmatprep.subr.mxu0 0.0
  %4435 = vmatpush1.msra.mxu0 0.0
  %4436 = vmatprep.subr.mxu0 0.0
  %4437 = vmatpush1.msra.mxu0 0.0
  %4438 = vmatprep.subr.mxu0 %v4344
  %4439 = vmatpush1.msra.mxu0 %v4341
  %4440 = vmatprep.subr.mxu0 %v4323
  %4441 = vmatpush1.msra.mxu0 %v4322
  %4442 = vmatprep.subr.mxu0 %v4316
  %4443 = vmatpush1.msra.mxu0 %v4315
  %4444 = vmatprep.subr.mxu0 %v4309
  %4445 = vmatpush1.msra.mxu0 %v4308
  %4446 = vmatprep.subr.mxu0 %v4302
  %4447 = vmatpush1.msra.mxu0 %v4301
  %4448 = vmatprep.subr.mxu0 %v4295
  %4449 = vmatpush1.msra.mxu0 %v4294
  %4450 = vmatprep.subr.mxu0 %v4288
  %4451 = vmatpush1.msra.mxu0 %v4287
  %4452 = vmatprep.subr.mxu0 %v4281
  %4453 = vmatpush1.msra.mxu0 %v4280
  %4454 = vmatprep.subr.mxu0 %v4274
  %4455 = vmatpush1.msra.mxu0 %v4273
  %4456 = vmatprep.subr.mxu0 %v4267
  %4457 = vmatpush1.msra.mxu0 %v4266
  %4458 = vmatprep.subr.mxu0 0.0
  %4459 = vmatpush2.msra.mxu0 0.0
  %4460 = vmatprep.subr.mxu0 0.0
  %4461 = vmatpush2.msra.mxu0 0.0
  %4462 = vmatprep.subr.mxu0 0.0
  %4463 = vmatpush2.msra.mxu0 0.0
  %4464 = vmatprep.subr.mxu0 0.0
  %4465 = vmatpush2.msra.mxu0 0.0
  %4466 = vmatprep.subr.mxu0 0.0
  %4467 = vmatpush2.msra.mxu0 0.0
  %4468 = vmatprep.subr.mxu0 0.0
  %4469 = vmatpush2.msra.mxu0 0.0
  %4470 = vmatprep.subr.mxu0 0.0
  %4471 = vmatpush2.msra.mxu0 0.0
  %4472 = vmatprep.subr.mxu0 0.0
  %4473 = vmatpush2.msra.mxu0 0.0
  %4474 = vmatprep.subr.mxu0 0.0
  %4475 = vmatpush2.msra.mxu0 0.0
  %4476 = vmatprep.subr.mxu0 0.0
  %4477 = vmatpush2.msra.mxu0 0.0
  %4478 = vmatprep.subr.mxu0 0.0
  %4479 = vmatpush2.msra.mxu0 0.0
  %4480 = vmatprep.subr.mxu0 0.0
  %4481 = vmatpush2.msra.mxu0 0.0
  %4482 = vmatprep.subr.mxu0 0.0
  %4483 = vmatpush2.msra.mxu0 0.0
  %4484 = vmatprep.subr.mxu0 0.0
  %4485 = vmatpush2.msra.mxu0 0.0
  %4486 = vmatprep.subr.mxu0 0.0
  %4487 = vmatpush2.msra.mxu0 0.0
  %4488 = vmatprep.subr.mxu0 0.0
  %4489 = vmatpush2.msra.mxu0 0.0
  %4490 = vmatprep.mubr.f32.mxu0 0.0
  %4491 = vmatmul.mubr.f32.gmra.mxu0 %v316
  %v4492 = vpop.f32.mrf.mxu0
  %v4493 = vadd.f32 %v312, %v4492
  %v4494 = vpop.f32.mrf.mxu0
  %v4495 = vadd.f32 %v312, %v4494
  %4496 = vdwg.mxu0
  %4497 = vmatprep.subr.mxu0 0.0
  %4498 = vmatpush1.msra.mxu0 0.0
  %4499 = vmatprep.subr.mxu0 0.0
  %4500 = vmatpush1.msra.mxu0 0.0
  %4501 = vmatprep.subr.mxu0 0.0
  %4502 = vmatpush1.msra.mxu0 0.0
  %4503 = vmatprep.subr.mxu0 0.0
  %4504 = vmatpush1.msra.mxu0 0.0
  %4505 = vmatprep.subr.mxu0 0.0
  %4506 = vmatpush1.msra.mxu0 0.0
  %4507 = vmatprep.subr.mxu0 0.0
  %4508 = vmatpush1.msra.mxu0 0.0
  %4509 = vmatprep.subr.mxu0 %v4350
  %4510 = vmatpush1.msra.mxu0 %v4347
  %4511 = vmatprep.subr.mxu0 %v4325
  %4512 = vmatpush1.msra.mxu0 %v4324
  %4513 = vmatprep.subr.mxu0 %v4318
  %4514 = vmatpush1.msra.mxu0 %v4317
  %4515 = vmatprep.subr.mxu0 %v4311
  %4516 = vmatpush1.msra.mxu0 %v4310
  %4517 = vmatprep.subr.mxu0 %v4304
  %4518 = vmatpush1.msra.mxu0 %v4303
  %4519 = vmatprep.subr.mxu0 %v4297
  %4520 = vmatpush1.msra.mxu0 %v4296
  %4521 = vmatprep.subr.mxu0 %v4290
  %4522 = vmatpush1.msra.mxu0 %v4289
  %4523 = vmatprep.subr.mxu0 %v4283
  %4524 = vmatpush1.msra.mxu0 %v4282
  %4525 = vmatprep.subr.mxu0 %v4276
  %4526 = vmatpush1.msra.mxu0 %v4275
  %4527 = vmatprep.subr.mxu0 %v4269
  %4528 = vmatpush1.msra.mxu0 %v4268
  %4529 = vmatprep.subr.mxu0 0.0
  %4530 = vmatpush2.msra.mxu0 0.0
  %4531 = vmatprep.subr.mxu0 0.0
  %4532 = vmatpush2.msra.mxu0 0.0
  %4533 = vmatprep.subr.mxu0 0.0
  %4534 = vmatpush2.msra.mxu0 0.0
  %4535 = vmatprep.subr.mxu0 0.0
  %4536 = vmatpush2.msra.mxu0 0.0
  %4537 = vmatprep.subr.mxu0 0.0
  %4538 = vmatpush2.msra.mxu0 0.0
  %4539 = vmatprep.subr.mxu0 0.0
  %4540 = vmatpush2.msra.mxu0 0.0
  %4541 = vmatprep.subr.mxu0 0.0
  %4542 = vmatpush2.msra.mxu0 0.0
  %4543 = vmatprep.subr.mxu0 0.0
  %4544 = vmatpush2.msra.mxu0 0.0
  %4545 = vmatprep.subr.mxu0 0.0
  %4546 = vmatpush2.msra.mxu0 0.0
  %4547 = vmatprep.subr.mxu0 0.0
  %4548 = vmatpush2.msra.mxu0 0.0
  %4549 = vmatprep.subr.mxu0 0.0
  %4550 = vmatpush2.msra.mxu0 0.0
  %4551 = vmatprep.subr.mxu0 0.0
  %4552 = vmatpush2.msra.mxu0 0.0
  %4553 = vmatprep.subr.mxu0 0.0
  %4554 = vmatpush2.msra.mxu0 0.0
  %4555 = vmatprep.subr.mxu0 0.0
  %4556 = vmatpush2.msra.mxu0 0.0
  %4557 = vmatprep.subr.mxu0 0.0
  %4558 = vmatpush2.msra.mxu0 0.0
  %4559 = vmatprep.subr.mxu0 0.0
  %4560 = vmatpush2.msra.mxu0 0.0
  %4561 = vmatprep.mubr.f32.mxu0 0.0
  %4562 = vmatmul.mubr.f32.gmra.mxu0 %v316
  %v4563 = vpop.f32.mrf.mxu0
  %v4564 = vadd.f32 %v312, %v4563
  %v4565 = vpop.f32.mrf.mxu0
  %v4566 = vadd.f32 %v312, %v4565
  %4567 = vdwg.mxu0
  %4568 = vmatprep.subr.mxu0 0.0
  %4569 = vmatpush1.msra.mxu0 0.0
  %4570 = vmatprep.subr.mxu0 0.0
  %4571 = vmatpush1.msra.mxu0 0.0
  %4572 = vmatprep.subr.mxu0 0.0
  %4573 = vmatpush1.msra.mxu0 0.0
  %4574 = vmatprep.subr.mxu0 0.0
  %4575 = vmatpush1.msra.mxu0 0.0
  %4576 = vmatprep.subr.mxu0 0.0
  %4577 = vmatpush1.msra.mxu0 0.0
  %4578 = vmatprep.subr.mxu0 0.0
  %4579 = vmatpush1.msra.mxu0 0.0
  %4580 = vmatprep.subr.mxu0 0.0
  %4581 = vmatpush1.msra.mxu0 %v4353
  %4582 = vmatprep.subr.mxu0 0.0
  %4583 = vmatpush1.msra.mxu0 %v4326
  %4584 = vmatprep.subr.mxu0 0.0
  %4585 = vmatpush1.msra.mxu0 %v4319
  %4586 = vmatprep.subr.mxu0 0.0
  %4587 = vmatpush1.msra.mxu0 %v4312
  %4588 = vmatprep.subr.mxu0 0.0
  %4589 = vmatpush1.msra.mxu0 %v4305
  %4590 = vmatprep.subr.mxu0 0.0
  %4591 = vmatpush1.msra.mxu0 %v4298
  %4592 = vmatprep.subr.mxu0 0.0
  %4593 = vmatpush1.msra.mxu0 %v4291
  %4594 = vmatprep.subr.mxu0 0.0
  %4595 = vmatpush1.msra.mxu0 %v4284
  %4596 = vmatprep.subr.mxu0 0.0
  %4597 = vmatpush1.msra.mxu0 %v4277
  %4598 = vmatprep.subr.mxu0 0.0
  %4599 = vmatpush1.msra.mxu0 %v4270
  %4600 = vmatprep.subr.mxu0 0.0
  %4601 = vmatpush2.msra.mxu0 0.0
  %4602 = vmatprep.subr.mxu0 0.0
  %4603 = vmatpush2.msra.mxu0 0.0
  %4604 = vmatprep.subr.mxu0 0.0
  %4605 = vmatpush2.msra.mxu0 0.0
  %4606 = vmatprep.subr.mxu0 0.0
  %4607 = vmatpush2.msra.mxu0 0.0
  %4608 = vmatprep.subr.mxu0 0.0
  %4609 = vmatpush2.msra.mxu0 0.0
  %4610 = vmatprep.subr.mxu0 0.0
  %4611 = vmatpush2.msra.mxu0 0.0
  %4612 = vmatprep.subr.mxu0 0.0
  %4613 = vmatpush2.msra.mxu0 0.0
  %4614 = vmatprep.subr.mxu0 0.0
  %4615 = vmatpush2.msra.mxu0 0.0
  %4616 = vmatprep.subr.mxu0 0.0
  %4617 = vmatpush2.msra.mxu0 0.0
  %4618 = vmatprep.subr.mxu0 0.0
  %4619 = vmatpush2.msra.mxu0 0.0
  %4620 = vmatprep.subr.mxu0 0.0
  %4621 = vmatpush2.msra.mxu0 0.0
  %4622 = vmatprep.subr.mxu0 0.0
  %4623 = vmatpush2.msra.mxu0 0.0
  %4624 = vmatprep.subr.mxu0 0.0
  %4625 = vmatpush2.msra.mxu0 0.0
  %4626 = vmatprep.subr.mxu0 0.0
  %4627 = vmatpush2.msra.mxu0 0.0
  %4628 = vmatprep.subr.mxu0 0.0
  %4629 = vmatpush2.msra.mxu0 0.0
  %4630 = vmatprep.subr.mxu0 0.0
  %4631 = vmatpush2.msra.mxu0 0.0
  %4632 = vmatprep.mubr.f32.mxu0 0.0
  %4633 = vmatmul.mubr.f32.gmra.mxu0 %v316
  %v4634 = vpop.f32.mrf.mxu0
  %v4635 = vadd.f32 %v312, %v4634
  %v4636 = vpop.f32.mrf.mxu0
  %4637 = vdwg.mxu0
  %v4638 = vtanh.pop %v4422
  %v4639 = vtanh.pop %v4424
  %v4640 = vtanh.pop %v4493
  %v4641 = vtanh.pop %v4495
  %v4642 = vtanh.pop %v4564
  %v4643 = vtanh.pop %v4566
  %v4644 = vtanh.pop %v4635
  %v4646 = vsel %vm630, %v4644, 0
  %4648 = vmatprep.subr.mxu0 %v74
  %4649 = vmatpush1.msra.mxu0 %v73
  %4650 = vmatprep.subr.mxu0 %v72
  %4651 = vmatpush1.msra.mxu0 %v71
  %4652 = vmatprep.subr.mxu0 %v70
  %4653 = vmatpush1.msra.mxu0 %v69
  %4654 = vmatprep.subr.mxu0 %v68
  %4655 = vmatpush1.msra.mxu0 %v67
  %4656 = vmatprep.subr.mxu0 %v66
  %4657 = vmatpush1.msra.mxu0 %v65
  %4658 = vmatprep.subr.mxu0 %v64
  %4659 = vmatpush1.msra.mxu0 %v63
  %4660 = vmatprep.subr.mxu0 %v62
  %4661 = vmatpush1.msra.mxu0 %v61
  %4662 = vmatprep.subr.mxu0 %v60
  %4663 = vmatpush1.msra.mxu0 %v59
  %4664 = vmatprep.subr.mxu0 %v58
  %4665 = vmatpush1.msra.mxu0 %v57
  %4666 = vmatprep.subr.mxu0 %v56
  %4667 = vmatpush1.msra.mxu0 %v55
  %4668 = vmatprep.subr.mxu0 %v54
  %4669 = vmatpush1.msra.mxu0 %v53
  %4670 = vmatprep.subr.mxu0 %v52
  %4671 = vmatpush1.msra.mxu0 %v51
  %4672 = vmatprep.subr.mxu0 %v50
  %4673 = vmatpush1.msra.mxu0 %v49
  %4674 = vmatprep.subr.mxu0 %v48
  %4675 = vmatpush1.msra.mxu0 %v47
  %4676 = vmatprep.subr.mxu0 %v46
  %4677 = vmatpush1.msra.mxu0 %v45
  %4678 = vmatprep.subr.mxu0 %v44
  %4679 = vmatpush1.msra.mxu0 %v43
  %4680 = vmatprep.subr.mxu0 %v106
  %4681 = vmatpush2.msra.mxu0 %v105
  %4682 = vmatprep.subr.mxu0 %v104
  %4683 = vmatpush2.msra.mxu0 %v103
  %4684 = vmatprep.subr.mxu0 %v102
  %4685 = vmatpush2.msra.mxu0 %v101
  %4686 = vmatprep.subr.mxu0 %v100
  %4687 = vmatpush2.msra.mxu0 %v99
  %4688 = vmatprep.subr.mxu0 %v98
  %4689 = vmatpush2.msra.mxu0 %v97
  %4690 = vmatprep.subr.mxu0 %v96
  %4691 = vmatpush2.msra.mxu0 %v95
  %4692 = vmatprep.subr.mxu0 %v94
  %4693 = vmatpush2.msra.mxu0 %v93
  %4694 = vmatprep.subr.mxu0 %v92
  %4695 = vmatpush2.msra.mxu0 %v91
  %4696 = vmatprep.subr.mxu0 %v90
  %4697 = vmatpush2.msra.mxu0 %v89
  %4698 = vmatprep.subr.mxu0 %v88
  %4699 = vmatpush2.msra.mxu0 %v87
  %4700 = vmatprep.subr.mxu0 %v86
  %4701 = vmatpush2.msra.mxu0 %v85
  %4702 = vmatprep.subr.mxu0 %v84
  %4703 = vmatpush2.msra.mxu0 %v83
  %4704 = vmatprep.subr.mxu0 %v82
  %4705 = vmatpush2.msra.mxu0 %v81
  %4706 = vmatprep.subr.mxu0 %v80
  %4707 = vmatpush2.msra.mxu0 %v79
  %4708 = vmatprep.subr.mxu0 %v78
  %4709 = vmatpush2.msra.mxu0 %v77
  %4710 = vmatprep.subr.mxu0 %v76
  %4711 = vmatpush2.msra.mxu0 %v75
  %4712 = vmatprep.mubr.f32.mxu0 %v4639
  %4713 = vmatmul.mubr.f32.gmra.mxu0 %v4638
  %v4714 = vpop.f32.mrf.mxu0
  %v4715 = vadd.f32 0.0, %v4714
  %v4716 = vpop.f32.mrf.mxu0
  %v4717 = vadd.f32 0.0, %v4716
  %4718 = vdwg.mxu0
  %4719 = vmatprep.subr.mxu0 %v138
  %4720 = vmatpush1.msra.mxu0 %v137
  %4721 = vmatprep.subr.mxu0 %v136
  %4722 = vmatpush1.msra.mxu0 %v135
  %4723 = vmatprep.subr.mxu0 %v134
  %4724 = vmatpush1.msra.mxu0 %v133
  %4725 = vmatprep.subr.mxu0 %v132
  %4726 = vmatpush1.msra.mxu0 %v131
  %4727 = vmatprep.subr.mxu0 %v130
  %4728 = vmatpush1.msra.mxu0 %v129
  %4729 = vmatprep.subr.mxu0 %v128
  %4730 = vmatpush1.msra.mxu0 %v127
  %4731 = vmatprep.subr.mxu0 %v126
  %4732 = vmatpush1.msra.mxu0 %v125
  %4733 = vmatprep.subr.mxu0 %v124
  %4734 = vmatpush1.msra.mxu0 %v123
  %4735 = vmatprep.subr.mxu0 %v122
  %4736 = vmatpush1.msra.mxu0 %v121
  %4737 = vmatprep.subr.mxu0 %v120
  %4738 = vmatpush1.msra.mxu0 %v119
  %4739 = vmatprep.subr.mxu0 %v118
  %4740 = vmatpush1.msra.mxu0 %v117
  %4741 = vmatprep.subr.mxu0 %v116
  %4742 = vmatpush1.msra.mxu0 %v115
  %4743 = vmatprep.subr.mxu0 %v114
  %4744 = vmatpush1.msra.mxu0 %v113
  %4745 = vmatprep.subr.mxu0 %v112
  %4746 = vmatpush1.msra.mxu0 %v111
  %4747 = vmatprep.subr.mxu0 %v110
  %4748 = vmatpush1.msra.mxu0 %v109
  %4749 = vmatprep.subr.mxu0 %v108
  %4750 = vmatpush1.msra.mxu0 %v107
  %4751 = vmatprep.subr.mxu0 %v170
  %4752 = vmatpush2.msra.mxu0 %v169
  %4753 = vmatprep.subr.mxu0 %v168
  %4754 = vmatpush2.msra.mxu0 %v167
  %4755 = vmatprep.subr.mxu0 %v166
  %4756 = vmatpush2.msra.mxu0 %v165
  %4757 = vmatprep.subr.mxu0 %v164
  %4758 = vmatpush2.msra.mxu0 %v163
  %4759 = vmatprep.subr.mxu0 %v162
  %4760 = vmatpush2.msra.mxu0 %v161
  %4761 = vmatprep.subr.mxu0 %v160
  %4762 = vmatpush2.msra.mxu0 %v159
  %4763 = vmatprep.subr.mxu0 %v158
  %4764 = vmatpush2.msra.mxu0 %v157
  %4765 = vmatprep.subr.mxu0 %v156
  %4766 = vmatpush2.msra.mxu0 %v155
  %4767 = vmatprep.subr.mxu0 %v154
  %4768 = vmatpush2.msra.mxu0 %v153
  %4769 = vmatprep.subr.mxu0 %v152
  %4770 = vmatpush2.msra.mxu0 %v151
  %4771 = vmatprep.subr.mxu0 %v150
  %4772 = vmatpush2.msra.mxu0 %v149
  %4773 = vmatprep.subr.mxu0 %v148
  %4774 = vmatpush2.msra.mxu0 %v147
  %4775 = vmatprep.subr.mxu0 %v146
  %4776 = vmatpush2.msra.mxu0 %v145
  %4777 = vmatprep.subr.mxu0 %v144
  %4778 = vmatpush2.msra.mxu0 %v143
  %4779 = vmatprep.subr.mxu0 %v142
  %4780 = vmatpush2.msra.mxu0 %v141
  %4781 = vmatprep.subr.mxu0 %v140
  %4782 = vmatpush2.msra.mxu0 %v139
  %4783 = vmatprep.mubr.f32.mxu0 %v4641
  %4784 = vmatmul.mubr.f32.gmra.mxu0 %v4640
  %v4785 = vpop.f32.mrf.mxu0
  %v4786 = vadd.f32 %v4715, %v4785
  %v4787 = vpop.f32.mrf.mxu0
  %v4788 = vadd.f32 %v4717, %v4787
  %4789 = vdwg.mxu0
  %4790 = vmatprep.subr.mxu0 %v202
  %4791 = vmatpush1.msra.mxu0 %v201
  %4792 = vmatprep.subr.mxu0 %v200
  %4793 = vmatpush1.msra.mxu0 %v199
  %4794 = vmatprep.subr.mxu0 %v198
  %4795 = vmatpush1.msra.mxu0 %v197
  %4796 = vmatprep.subr.mxu0 %v196
  %4797 = vmatpush1.msra.mxu0 %v195
  %4798 = vmatprep.subr.mxu0 %v194
  %4799 = vmatpush1.msra.mxu0 %v193
  %4800 = vmatprep.subr.mxu0 %v192
  %4801 = vmatpush1.msra.mxu0 %v191
  %4802 = vmatprep.subr.mxu0 %v190
  %4803 = vmatpush1.msra.mxu0 %v189
  %4804 = vmatprep.subr.mxu0 %v188
  %4805 = vmatpush1.msra.mxu0 %v187
  %4806 = vmatprep.subr.mxu0 %v186
  %4807 = vmatpush1.msra.mxu0 %v185
  %4808 = vmatprep.subr.mxu0 %v184
  %4809 = vmatpush1.msra.mxu0 %v183
  %4810 = vmatprep.subr.mxu0 %v182
  %4811 = vmatpush1.msra.mxu0 %v181
  %4812 = vmatprep.subr.mxu0 %v180
  %4813 = vmatpush1.msra.mxu0 %v179
  %4814 = vmatprep.subr.mxu0 %v178
  %4815 = vmatpush1.msra.mxu0 %v177
  %4816 = vmatprep.subr.mxu0 %v176
  %4817 = vmatpush1.msra.mxu0 %v175
  %4818 = vmatprep.subr.mxu0 %v174
  %4819 = vmatpush1.msra.mxu0 %v173
  %4820 = vmatprep.subr.mxu0 %v172
  %4821 = vmatpush1.msra.mxu0 %v171
  %4822 = vmatprep.subr.mxu0 %v234
  %4823 = vmatpush2.msra.mxu0 %v233
  %4824 = vmatprep.subr.mxu0 %v232
  %4825 = vmatpush2.msra.mxu0 %v231
  %4826 = vmatprep.subr.mxu0 %v230
  %4827 = vmatpush2.msra.mxu0 %v229
  %4828 = vmatprep.subr.mxu0 %v228
  %4829 = vmatpush2.msra.mxu0 %v227
  %4830 = vmatprep.subr.mxu0 %v226
  %4831 = vmatpush2.msra.mxu0 %v225
  %4832 = vmatprep.subr.mxu0 %v224
  %4833 = vmatpush2.msra.mxu0 %v223
  %4834 = vmatprep.subr.mxu0 %v222
  %4835 = vmatpush2.msra.mxu0 %v221
  %4836 = vmatprep.subr.mxu0 %v220
  %4837 = vmatpush2.msra.mxu0 %v219
  %4838 = vmatprep.subr.mxu0 %v218
  %4839 = vmatpush2.msra.mxu0 %v217
  %4840 = vmatprep.subr.mxu0 %v216
  %4841 = vmatpush2.msra.mxu0 %v215
  %4842 = vmatprep.subr.mxu0 %v214
  %4843 = vmatpush2.msra.mxu0 %v213
  %4844 = vmatprep.subr.mxu0 %v212
  %4845 = vmatpush2.msra.mxu0 %v211
  %4846 = vmatprep.subr.mxu0 %v210
  %4847 = vmatpush2.msra.mxu0 %v209
  %4848 = vmatprep.subr.mxu0 %v208
  %4849 = vmatpush2.msra.mxu0 %v207
  %4850 = vmatprep.subr.mxu0 %v206
  %4851 = vmatpush2.msra.mxu0 %v205
  %4852 = vmatprep.subr.mxu0 %v204
  %4853 = vmatpush2.msra.mxu0 %v203
  %4854 = vmatprep.mubr.f32.mxu0 %v4643
  %4855 = vmatmul.mubr.f32.gmra.mxu0 %v4642
  %v4856 = vpop.f32.mrf.mxu0
  %v4857 = vadd.f32 %v4786, %v4856
  %v4858 = vpop.f32.mrf.mxu0
  %v4859 = vadd.f32 %v4788, %v4858
  %4860 = vdwg.mxu0
  %4861 = vmatprep.subr.mxu0 0.0
  %4862 = vmatpush1.msra.mxu0 0.0
  %4863 = vmatprep.subr.mxu0 0.0
  %4864 = vmatpush1.msra.mxu0 0.0
  %4865 = vmatprep.subr.mxu0 0.0
  %4866 = vmatpush1.msra.mxu0 0.0
  %4867 = vmatprep.subr.mxu0 0.0
  %4868 = vmatpush1.msra.mxu0 0.0
  %4869 = vmatprep.subr.mxu0 0.0
  %4870 = vmatpush1.msra.mxu0 0.0
  %4871 = vmatprep.subr.mxu0 0.0
  %4872 = vmatpush1.msra.mxu0 0.0
  %4873 = vmatprep.subr.mxu0 0.0
  %4874 = vmatpush1.msra.mxu0 0.0
  %4875 = vmatprep.subr.mxu0 0.0
  %4876 = vmatpush1.msra.mxu0 0.0
  %4877 = vmatprep.subr.mxu0 0.0
  %4878 = vmatpush1.msra.mxu0 0.0
  %4879 = vmatprep.subr.mxu0 0.0
  %4880 = vmatpush1.msra.mxu0 0.0
  %4881 = vmatprep.subr.mxu0 0.0
  %4882 = vmatpush1.msra.mxu0 0.0
  %4883 = vmatprep.subr.mxu0 0.0
  %4884 = vmatpush1.msra.mxu0 0.0
  %4885 = vmatprep.subr.mxu0 0.0
  %4886 = vmatpush1.msra.mxu0 0.0
  %4887 = vmatprep.subr.mxu0 0.0
  %4888 = vmatpush1.msra.mxu0 0.0
  %4889 = vmatprep.subr.mxu0 %v238
  %4890 = vmatpush1.msra.mxu0 %v237
  %4891 = vmatprep.subr.mxu0 %v236
  %4892 = vmatpush1.msra.mxu0 %v235
  %4893 = vmatprep.subr.mxu0 0.0
  %4894 = vmatpush2.msra.mxu0 0.0
  %4895 = vmatprep.subr.mxu0 0.0
  %4896 = vmatpush2.msra.mxu0 0.0
  %4897 = vmatprep.subr.mxu0 0.0
  %4898 = vmatpush2.msra.mxu0 0.0
  %4899 = vmatprep.subr.mxu0 0.0
  %4900 = vmatpush2.msra.mxu0 0.0
  %4901 = vmatprep.subr.mxu0 0.0
  %4902 = vmatpush2.msra.mxu0 0.0
  %4903 = vmatprep.subr.mxu0 0.0
  %4904 = vmatpush2.msra.mxu0 0.0
  %4905 = vmatprep.subr.mxu0 0.0
  %4906 = vmatpush2.msra.mxu0 0.0
  %4907 = vmatprep.subr.mxu0 0.0
  %4908 = vmatpush2.msra.mxu0 0.0
  %4909 = vmatprep.subr.mxu0 0.0
  %4910 = vmatpush2.msra.mxu0 0.0
  %4911 = vmatprep.subr.mxu0 0.0
  %4912 = vmatpush2.msra.mxu0 0.0
  %4913 = vmatprep.subr.mxu0 0.0
  %4914 = vmatpush2.msra.mxu0 0.0
  %4915 = vmatprep.subr.mxu0 0.0
  %4916 = vmatpush2.msra.mxu0 0.0
  %4917 = vmatprep.subr.mxu0 0.0
  %4918 = vmatpush2.msra.mxu0 0.0
  %4919 = vmatprep.subr.mxu0 0.0
  %4920 = vmatpush2.msra.mxu0 0.0
  %4921 = vmatprep.subr.mxu0 0.0
  %4922 = vmatpush2.msra.mxu0 0.0
  %4923 = vmatprep.subr.mxu0 0.0
  %4924 = vmatpush2.msra.mxu0 0.0
  %4925 = vmatprep.mubr.f32.mxu0 0.0
  %4926 = vmatmul.mubr.f32.gmra.mxu0 %v4646
  %v4927 = vpop.f32.mrf.mxu0
  %v4928 = vadd.f32 %v4857, %v4927
  %v4929 = vpop.f32.mrf.mxu0
  %v4930 = vadd.f32 %v4859, %v4929
  %4931 = vdwg.mxu0
  %s4932 = scalar_lea.vmem %s0, 3920
  %v4933 = vld [vmem:[%s4932] sm:$0xff]
  %v4934 = vld [vmem:[%s4932 + $0x8] sm:$0xff]
  %v4935 = vld [vmem:[%s4932 + $0x10] sm:$0xff]
  %v4936 = vld [vmem:[%s4932 + $0x18] sm:$0xff]
  %v4937 = vld [vmem:[%s4932 + $0x20] sm:$0xff]
  %v4938 = vld [vmem:[%s4932 + $0x28] sm:$0xff]
  %v4939 = vld [vmem:[%s4932 + $0x30] sm:$0xff]
  %v4940 = vld [vmem:[%s4932 + $0x38] sm:$0xff]
  %v4941 = vld [vmem:[%s4932 + $0x40] sm:$0xff]
  %v4942 = vld [vmem:[%s4932 + $0x48] sm:$0xff]
  %v4943 = vld [vmem:[%s4932 + $0x50] sm:$0xff]
  %v4944 = vld [vmem:[%s4932 + $0x58] sm:$0xff]
  %v4945 = vld [vmem:[%s4932 + $0x60] sm:$0xff]
  %v4946 = vld [vmem:[%s4932 + $0x68] sm:$0xff]
  %v4947 = vld [vmem:[%s4932 + $0x70] sm:$0xff]
  %v4948 = vld [vmem:[%s4932 + $0x78] sm:$0xff]
  %v4949 = vld [vmem:[%s4932 + $0x80] sm:$0xff]
  %v4950 = vld [vmem:[%s4932 + $0x88] sm:$0xff]
  %v4951 = vld [vmem:[%s4932 + $0x90] sm:$0xff]
  %v4952 = vld [vmem:[%s4932 + $0x98] sm:$0xff]
  %v4953 = vld [vmem:[%s4932 + $0xa0] sm:$0xff]
  %v4954 = vld [vmem:[%s4932 + $0xa8] sm:$0xff]
  %v4955 = vld [vmem:[%s4932 + $0xb0] sm:$0xff]
  %v4956 = vld [vmem:[%s4932 + $0xb8] sm:$0xff]
  %v4957 = vld [vmem:[%s4932 + $0xc0] sm:$0xff]
  %v4958 = vld [vmem:[%s4932 + $0xc8] sm:$0xff]
  %v4959 = vld [vmem:[%s4932 + $0xd0] sm:$0xff]
  %v4960 = vld [vmem:[%s4932 + $0xd8] sm:$0xff]
  %v4961 = vld [vmem:[%s4932 + $0xe0] sm:$0xff]
  %v4962 = vld [vmem:[%s4932 + $0xe8] sm:$0xff]
  %v4963 = vld [vmem:[%s4932 + $0xf0] sm:$0xff]
  %v4964 = vld [vmem:[%s4932 + $0xf8] sm:$0xff]
  %v4965 = vld [vmem:[%s4932 + $0x100] sm:$0xff]
  %v4966 = vld [vmem:[%s4932 + $0x108] sm:$0xff]
  %v4967 = vld [vmem:[%s4932 + $0x110] sm:$0xff]
  %v4968 = vld [vmem:[%s4932 + $0x118] sm:$0xff]
  %v4969 = vld [vmem:[%s4932 + $0x120] sm:$0xff]
  %v4970 = vld [vmem:[%s4932 + $0x128] sm:$0xff]
  %v4971 = vld [vmem:[%s4932 + $0x130] sm:$0xff]
  %v4972 = vld [vmem:[%s4932 + $0x138] sm:$0xff]
  %v4973 = vld [vmem:[%s4932 + $0x140] sm:$0xff]
  %v4974 = vld [vmem:[%s4932 + $0x148] sm:$0xff]
  %v4975 = vld [vmem:[%s4932 + $0x150] sm:$0xff]
  %v4976 = vld [vmem:[%s4932 + $0x158] sm:$0xff]
  %v4977 = vld [vmem:[%s4932 + $0x160] sm:$0xff]
  %v4978 = vld [vmem:[%s4932 + $0x168] sm:$0xff]
  %v4979 = vld [vmem:[%s4932 + $0x170] sm:$0xff]
  %v4980 = vld [vmem:[%s4932 + $0x178] sm:$0xff]
  %v4981 = vld [vmem:[%s4932 + $0x180] sm:$0xff]
  %v4982 = vld [vmem:[%s4932 + $0x188] sm:$0xff]
  %v4983 = vld [vmem:[%s4932 + $0x190] sm:$0xff]
  %v4984 = vld [vmem:[%s4932 + $0x198] sm:$0xff]
  %v4985 = vld [vmem:[%s4932 + $0x1a0] sm:$0xff]
  %v4986 = vld [vmem:[%s4932 + $0x1a8] sm:$0xff]
  %v4987 = vld [vmem:[%s4932 + $0x1b0] sm:$0xff]
  %v4988 = vld [vmem:[%s4932 + $0x1b8] sm:$0xff]
  %v4989 = vld [vmem:[%s4932 + $0x1c0] sm:$0xff]
  %v4990 = vld [vmem:[%s4932 + $0x1c8] sm:$0xff]
  %v4991 = vld [vmem:[%s4932 + $0x1d0] sm:$0xff]
  %v4992 = vld [vmem:[%s4932 + $0x1d8] sm:$0xff]
  %v4993 = vld [vmem:[%s4932 + $0x1e0] sm:$0xff]
  %v4994 = vld [vmem:[%s4932 + $0x1e8] sm:$0xff]
  %v4995 = vld [vmem:[%s4932 + $0x1f0] sm:$0xff]
  %v4996 = vld [vmem:[%s4932 + $0x1f8] sm:$0x7]
  %v4997 = vld [vmem:[%s4932 + $0x200] sm:$0x7]
  %v4998 = vld [vmem:[%s4932 + $0x208] sm:$0x7]
  %v4999 = vld [vmem:[%s4932 + $0x210] sm:$0x7]
  %v5000 = vld [vmem:[%s4932 + $0x218] sm:$0x7]
  %v5001 = vld [vmem:[%s4932 + $0x220] sm:$0x7]
  %v5002 = vld [vmem:[%s4932 + $0x228] sm:$0x7]
  %v5004 = vsel %vm318, %v4996, 0
  %v5007 = vsel %vm318, %v4997, 0
  %v5010 = vsel %vm318, %v4998, 0
  %v5013 = vsel %vm318, %v4999, 0
  %v5016 = vsel %vm318, %v5000, 0
  %v5019 = vsel %vm318, %v5001, 0
  %v5022 = vsel %vm318, %v5002, 0
  %5024 = vmatprep.subr.mxu0 0.0
  %5025 = vmatpush1.msra.mxu0 0.0
  %5026 = vmatprep.subr.mxu0 0.0
  %5027 = vmatpush1.msra.mxu0 0.0
  %5028 = vmatprep.subr.mxu0 0.0
  %5029 = vmatpush1.msra.mxu0 0.0
  %5030 = vmatprep.subr.mxu0 0.0
  %5031 = vmatpush1.msra.mxu0 0.0
  %5032 = vmatprep.subr.mxu0 0.0
  %5033 = vmatpush1.msra.mxu0 0.0
  %5034 = vmatprep.subr.mxu0 0.0
  %5035 = vmatpush1.msra.mxu0 0.0
  %5036 = vmatprep.subr.mxu0 %v5007
  %5037 = vmatpush1.msra.mxu0 %v5004
  %5038 = vmatprep.subr.mxu0 %v4990
  %5039 = vmatpush1.msra.mxu0 %v4989
  %5040 = vmatprep.subr.mxu0 %v4983
  %5041 = vmatpush1.msra.mxu0 %v4982
  %5042 = vmatprep.subr.mxu0 %v4976
  %5043 = vmatpush1.msra.mxu0 %v4975
  %5044 = vmatprep.subr.mxu0 %v4969
  %5045 = vmatpush1.msra.mxu0 %v4968
  %5046 = vmatprep.subr.mxu0 %v4962
  %5047 = vmatpush1.msra.mxu0 %v4961
  %5048 = vmatprep.subr.mxu0 %v4955
  %5049 = vmatpush1.msra.mxu0 %v4954
  %5050 = vmatprep.subr.mxu0 %v4948
  %5051 = vmatpush1.msra.mxu0 %v4947
  %5052 = vmatprep.subr.mxu0 %v4941
  %5053 = vmatpush1.msra.mxu0 %v4940
  %5054 = vmatprep.subr.mxu0 %v4934
  %5055 = vmatpush1.msra.mxu0 %v4933
  %5056 = vmatprep.subr.mxu0 0.0
  %5057 = vmatpush2.msra.mxu0 0.0
  %5058 = vmatprep.subr.mxu0 0.0
  %5059 = vmatpush2.msra.mxu0 0.0
  %5060 = vmatprep.subr.mxu0 0.0
  %5061 = vmatpush2.msra.mxu0 0.0
  %5062 = vmatprep.subr.mxu0 0.0
  %5063 = vmatpush2.msra.mxu0 0.0
  %5064 = vmatprep.subr.mxu0 0.0
  %5065 = vmatpush2.msra.mxu0 0.0
  %5066 = vmatprep.subr.mxu0 0.0
  %5067 = vmatpush2.msra.mxu0 0.0
  %5068 = vmatprep.subr.mxu0 0.0
  %5069 = vmatpush2.msra.mxu0 0.0
  %5070 = vmatprep.subr.mxu0 0.0
  %5071 = vmatpush2.msra.mxu0 0.0
  %5072 = vmatprep.subr.mxu0 0.0
  %5073 = vmatpush2.msra.mxu0 0.0
  %5074 = vmatprep.subr.mxu0 0.0
  %5075 = vmatpush2.msra.mxu0 0.0
  %5076 = vmatprep.subr.mxu0 0.0
  %5077 = vmatpush2.msra.mxu0 0.0
  %5078 = vmatprep.subr.mxu0 0.0
  %5079 = vmatpush2.msra.mxu0 0.0
  %5080 = vmatprep.subr.mxu0 0.0
  %5081 = vmatpush2.msra.mxu0 0.0
  %5082 = vmatprep.subr.mxu0 0.0
  %5083 = vmatpush2.msra.mxu0 0.0
  %5084 = vmatprep.subr.mxu0 0.0
  %5085 = vmatpush2.msra.mxu0 0.0
  %5086 = vmatprep.subr.mxu0 0.0
  %5087 = vmatpush2.msra.mxu0 0.0
  %5088 = vmatprep.mubr.f32.mxu0 0.0
  %5089 = vmatmul.mubr.f32.gmra.mxu0 %v316
  %v5090 = vpop.f32.mrf.mxu0
  %v5091 = vadd.f32 %v312, %v5090
  %v5092 = vpop.f32.mrf.mxu0
  %v5093 = vadd.f32 %v312, %v5092
  %5094 = vdwg.mxu0
  %5095 = vmatprep.subr.mxu0 0.0
  %5096 = vmatpush1.msra.mxu0 0.0
  %5097 = vmatprep.subr.mxu0 0.0
  %5098 = vmatpush1.msra.mxu0 0.0
  %5099 = vmatprep.subr.mxu0 0.0
  %5100 = vmatpush1.msra.mxu0 0.0
  %5101 = vmatprep.subr.mxu0 0.0
  %5102 = vmatpush1.msra.mxu0 0.0
  %5103 = vmatprep.subr.mxu0 0.0
  %5104 = vmatpush1.msra.mxu0 0.0
  %5105 = vmatprep.subr.mxu0 0.0
  %5106 = vmatpush1.msra.mxu0 0.0
  %5107 = vmatprep.subr.mxu0 %v5013
  %5108 = vmatpush1.msra.mxu0 %v5010
  %5109 = vmatprep.subr.mxu0 %v4992
  %5110 = vmatpush1.msra.mxu0 %v4991
  %5111 = vmatprep.subr.mxu0 %v4985
  %5112 = vmatpush1.msra.mxu0 %v4984
  %5113 = vmatprep.subr.mxu0 %v4978
  %5114 = vmatpush1.msra.mxu0 %v4977
  %5115 = vmatprep.subr.mxu0 %v4971
  %5116 = vmatpush1.msra.mxu0 %v4970
  %5117 = vmatprep.subr.mxu0 %v4964
  %5118 = vmatpush1.msra.mxu0 %v4963
  %5119 = vmatprep.subr.mxu0 %v4957
  %5120 = vmatpush1.msra.mxu0 %v4956
  %5121 = vmatprep.subr.mxu0 %v4950
  %5122 = vmatpush1.msra.mxu0 %v4949
  %5123 = vmatprep.subr.mxu0 %v4943
  %5124 = vmatpush1.msra.mxu0 %v4942
  %5125 = vmatprep.subr.mxu0 %v4936
  %5126 = vmatpush1.msra.mxu0 %v4935
  %5127 = vmatprep.subr.mxu0 0.0
  %5128 = vmatpush2.msra.mxu0 0.0
  %5129 = vmatprep.subr.mxu0 0.0
  %5130 = vmatpush2.msra.mxu0 0.0
  %5131 = vmatprep.subr.mxu0 0.0
  %5132 = vmatpush2.msra.mxu0 0.0
  %5133 = vmatprep.subr.mxu0 0.0
  %5134 = vmatpush2.msra.mxu0 0.0
  %5135 = vmatprep.subr.mxu0 0.0
  %5136 = vmatpush2.msra.mxu0 0.0
  %5137 = vmatprep.subr.mxu0 0.0
  %5138 = vmatpush2.msra.mxu0 0.0
  %5139 = vmatprep.subr.mxu0 0.0
  %5140 = vmatpush2.msra.mxu0 0.0
  %5141 = vmatprep.subr.mxu0 0.0
  %5142 = vmatpush2.msra.mxu0 0.0
  %5143 = vmatprep.subr.mxu0 0.0
  %5144 = vmatpush2.msra.mxu0 0.0
  %5145 = vmatprep.subr.mxu0 0.0
  %5146 = vmatpush2.msra.mxu0 0.0
  %5147 = vmatprep.subr.mxu0 0.0
  %5148 = vmatpush2.msra.mxu0 0.0
  %5149 = vmatprep.subr.mxu0 0.0
  %5150 = vmatpush2.msra.mxu0 0.0
  %5151 = vmatprep.subr.mxu0 0.0
  %5152 = vmatpush2.msra.mxu0 0.0
  %5153 = vmatprep.subr.mxu0 0.0
  %5154 = vmatpush2.msra.mxu0 0.0
  %5155 = vmatprep.subr.mxu0 0.0
  %5156 = vmatpush2.msra.mxu0 0.0
  %5157 = vmatprep.subr.mxu0 0.0
  %5158 = vmatpush2.msra.mxu0 0.0
  %5159 = vmatprep.mubr.f32.mxu0 0.0
  %5160 = vmatmul.mubr.f32.gmra.mxu0 %v316
  %v5161 = vpop.f32.mrf.mxu0
  %v5162 = vadd.f32 %v312, %v5161
  %v5163 = vpop.f32.mrf.mxu0
  %v5164 = vadd.f32 %v312, %v5163
  %5165 = vdwg.mxu0
  %5166 = vmatprep.subr.mxu0 0.0
  %5167 = vmatpush1.msra.mxu0 0.0
  %5168 = vmatprep.subr.mxu0 0.0
  %5169 = vmatpush1.msra.mxu0 0.0
  %5170 = vmatprep.subr.mxu0 0.0
  %5171 = vmatpush1.msra.mxu0 0.0
  %5172 = vmatprep.subr.mxu0 0.0
  %5173 = vmatpush1.msra.mxu0 0.0
  %5174 = vmatprep.subr.mxu0 0.0
  %5175 = vmatpush1.msra.mxu0 0.0
  %5176 = vmatprep.subr.mxu0 0.0
  %5177 = vmatpush1.msra.mxu0 0.0
  %5178 = vmatprep.subr.mxu0 %v5019
  %5179 = vmatpush1.msra.mxu0 %v5016
  %5180 = vmatprep.subr.mxu0 %v4994
  %5181 = vmatpush1.msra.mxu0 %v4993
  %5182 = vmatprep.subr.mxu0 %v4987
  %5183 = vmatpush1.msra.mxu0 %v4986
  %5184 = vmatprep.subr.mxu0 %v4980
  %5185 = vmatpush1.msra.mxu0 %v4979
  %5186 = vmatprep.subr.mxu0 %v4973
  %5187 = vmatpush1.msra.mxu0 %v4972
  %5188 = vmatprep.subr.mxu0 %v4966
  %5189 = vmatpush1.msra.mxu0 %v4965
  %5190 = vmatprep.subr.mxu0 %v4959
  %5191 = vmatpush1.msra.mxu0 %v4958
  %5192 = vmatprep.subr.mxu0 %v4952
  %5193 = vmatpush1.msra.mxu0 %v4951
  %5194 = vmatprep.subr.mxu0 %v4945
  %5195 = vmatpush1.msra.mxu0 %v4944
  %5196 = vmatprep.subr.mxu0 %v4938
  %5197 = vmatpush1.msra.mxu0 %v4937
  %5198 = vmatprep.subr.mxu0 0.0
  %5199 = vmatpush2.msra.mxu0 0.0
  %5200 = vmatprep.subr.mxu0 0.0
  %5201 = vmatpush2.msra.mxu0 0.0
  %5202 = vmatprep.subr.mxu0 0.0
  %5203 = vmatpush2.msra.mxu0 0.0
  %5204 = vmatprep.subr.mxu0 0.0
  %5205 = vmatpush2.msra.mxu0 0.0
  %5206 = vmatprep.subr.mxu0 0.0
  %5207 = vmatpush2.msra.mxu0 0.0
  %5208 = vmatprep.subr.mxu0 0.0
  %5209 = vmatpush2.msra.mxu0 0.0
  %5210 = vmatprep.subr.mxu0 0.0
  %5211 = vmatpush2.msra.mxu0 0.0
  %5212 = vmatprep.subr.mxu0 0.0
  %5213 = vmatpush2.msra.mxu0 0.0
  %5214 = vmatprep.subr.mxu0 0.0
  %5215 = vmatpush2.msra.mxu0 0.0
  %5216 = vmatprep.subr.mxu0 0.0
  %5217 = vmatpush2.msra.mxu0 0.0
  %5218 = vmatprep.subr.mxu0 0.0
  %5219 = vmatpush2.msra.mxu0 0.0
  %5220 = vmatprep.subr.mxu0 0.0
  %5221 = vmatpush2.msra.mxu0 0.0
  %5222 = vmatprep.subr.mxu0 0.0
  %5223 = vmatpush2.msra.mxu0 0.0
  %5224 = vmatprep.subr.mxu0 0.0
  %5225 = vmatpush2.msra.mxu0 0.0
  %5226 = vmatprep.subr.mxu0 0.0
  %5227 = vmatpush2.msra.mxu0 0.0
  %5228 = vmatprep.subr.mxu0 0.0
  %5229 = vmatpush2.msra.mxu0 0.0
  %5230 = vmatprep.mubr.f32.mxu0 0.0
  %5231 = vmatmul.mubr.f32.gmra.mxu0 %v316
  %v5232 = vpop.f32.mrf.mxu0
  %v5233 = vadd.f32 %v312, %v5232
  %v5234 = vpop.f32.mrf.mxu0
  %v5235 = vadd.f32 %v312, %v5234
  %5236 = vdwg.mxu0
  %5237 = vmatprep.subr.mxu0 0.0
  %5238 = vmatpush1.msra.mxu0 0.0
  %5239 = vmatprep.subr.mxu0 0.0
  %5240 = vmatpush1.msra.mxu0 0.0
  %5241 = vmatprep.subr.mxu0 0.0
  %5242 = vmatpush1.msra.mxu0 0.0
  %5243 = vmatprep.subr.mxu0 0.0
  %5244 = vmatpush1.msra.mxu0 0.0
  %5245 = vmatprep.subr.mxu0 0.0
  %5246 = vmatpush1.msra.mxu0 0.0
  %5247 = vmatprep.subr.mxu0 0.0
  %5248 = vmatpush1.msra.mxu0 0.0
  %5249 = vmatprep.subr.mxu0 0.0
  %5250 = vmatpush1.msra.mxu0 %v5022
  %5251 = vmatprep.subr.mxu0 0.0
  %5252 = vmatpush1.msra.mxu0 %v4995
  %5253 = vmatprep.subr.mxu0 0.0
  %5254 = vmatpush1.msra.mxu0 %v4988
  %5255 = vmatprep.subr.mxu0 0.0
  %5256 = vmatpush1.msra.mxu0 %v4981
  %5257 = vmatprep.subr.mxu0 0.0
  %5258 = vmatpush1.msra.mxu0 %v4974
  %5259 = vmatprep.subr.mxu0 0.0
  %5260 = vmatpush1.msra.mxu0 %v4967
  %5261 = vmatprep.subr.mxu0 0.0
  %5262 = vmatpush1.msra.mxu0 %v4960
  %5263 = vmatprep.subr.mxu0 0.0
  %5264 = vmatpush1.msra.mxu0 %v4953
  %5265 = vmatprep.subr.mxu0 0.0
  %5266 = vmatpush1.msra.mxu0 %v4946
  %5267 = vmatprep.subr.mxu0 0.0
  %5268 = vmatpush1.msra.mxu0 %v4939
  %5269 = vmatprep.subr.mxu0 0.0
  %5270 = vmatpush2.msra.mxu0 0.0
  %5271 = vmatprep.subr.mxu0 0.0
  %5272 = vmatpush2.msra.mxu0 0.0
  %5273 = vmatprep.subr.mxu0 0.0
  %5274 = vmatpush2.msra.mxu0 0.0
  %5275 = vmatprep.subr.mxu0 0.0
  %5276 = vmatpush2.msra.mxu0 0.0
  %5277 = vmatprep.subr.mxu0 0.0
  %5278 = vmatpush2.msra.mxu0 0.0
  %5279 = vmatprep.subr.mxu0 0.0
  %5280 = vmatpush2.msra.mxu0 0.0
  %5281 = vmatprep.subr.mxu0 0.0
  %5282 = vmatpush2.msra.mxu0 0.0
  %5283 = vmatprep.subr.mxu0 0.0
  %5284 = vmatpush2.msra.mxu0 0.0
  %5285 = vmatprep.subr.mxu0 0.0
  %5286 = vmatpush2.msra.mxu0 0.0
  %5287 = vmatprep.subr.mxu0 0.0
  %5288 = vmatpush2.msra.mxu0 0.0
  %5289 = vmatprep.subr.mxu0 0.0
  %5290 = vmatpush2.msra.mxu0 0.0
  %5291 = vmatprep.subr.mxu0 0.0
  %5292 = vmatpush2.msra.mxu0 0.0
  %5293 = vmatprep.subr.mxu0 0.0
  %5294 = vmatpush2.msra.mxu0 0.0
  %5295 = vmatprep.subr.mxu0 0.0
  %5296 = vmatpush2.msra.mxu0 0.0
  %5297 = vmatprep.subr.mxu0 0.0
  %5298 = vmatpush2.msra.mxu0 0.0
  %5299 = vmatprep.subr.mxu0 0.0
  %5300 = vmatpush2.msra.mxu0 0.0
  %5301 = vmatprep.mubr.f32.mxu0 0.0
  %5302 = vmatmul.mubr.f32.gmra.mxu0 %v316
  %v5303 = vpop.f32.mrf.mxu0
  %v5304 = vadd.f32 %v312, %v5303
  %v5305 = vpop.f32.mrf.mxu0
  %5306 = vdwg.mxu0
  %v5307 = vtanh.pop %v5091
  %v5308 = vtanh.pop %v5093
  %v5309 = vtanh.pop %v5162
  %v5310 = vtanh.pop %v5164
  %v5311 = vtanh.pop %v5233
  %v5312 = vtanh.pop %v5235
  %v5313 = vtanh.pop %v5304
  %v5315 = vsel %vm630, %v5313, 0
  %5317 = vmatprep.subr.mxu0 %v74
  %5318 = vmatpush1.msra.mxu0 %v73
  %5319 = vmatprep.subr.mxu0 %v72
  %5320 = vmatpush1.msra.mxu0 %v71
  %5321 = vmatprep.subr.mxu0 %v70
  %5322 = vmatpush1.msra.mxu0 %v69
  %5323 = vmatprep.subr.mxu0 %v68
  %5324 = vmatpush1.msra.mxu0 %v67
  %5325 = vmatprep.subr.mxu0 %v66
  %5326 = vmatpush1.msra.mxu0 %v65
  %5327 = vmatprep.subr.mxu0 %v64
  %5328 = vmatpush1.msra.mxu0 %v63
  %5329 = vmatprep.subr.mxu0 %v62
  %5330 = vmatpush1.msra.mxu0 %v61
  %5331 = vmatprep.subr.mxu0 %v60
  %5332 = vmatpush1.msra.mxu0 %v59
  %5333 = vmatprep.subr.mxu0 %v58
  %5334 = vmatpush1.msra.mxu0 %v57
  %5335 = vmatprep.subr.mxu0 %v56
  %5336 = vmatpush1.msra.mxu0 %v55
  %5337 = vmatprep.subr.mxu0 %v54
  %5338 = vmatpush1.msra.mxu0 %v53
  %5339 = vmatprep.subr.mxu0 %v52
  %5340 = vmatpush1.msra.mxu0 %v51
  %5341 = vmatprep.subr.mxu0 %v50
  %5342 = vmatpush1.msra.mxu0 %v49
  %5343 = vmatprep.subr.mxu0 %v48
  %5344 = vmatpush1.msra.mxu0 %v47
  %5345 = vmatprep.subr.mxu0 %v46
  %5346 = vmatpush1.msra.mxu0 %v45
  %5347 = vmatprep.subr.mxu0 %v44
  %5348 = vmatpush1.msra.mxu0 %v43
  %5349 = vmatprep.subr.mxu0 %v106
  %5350 = vmatpush2.msra.mxu0 %v105
  %5351 = vmatprep.subr.mxu0 %v104
  %5352 = vmatpush2.msra.mxu0 %v103
  %5353 = vmatprep.subr.mxu0 %v102
  %5354 = vmatpush2.msra.mxu0 %v101
  %5355 = vmatprep.subr.mxu0 %v100
  %5356 = vmatpush2.msra.mxu0 %v99
  %5357 = vmatprep.subr.mxu0 %v98
  %5358 = vmatpush2.msra.mxu0 %v97
  %5359 = vmatprep.subr.mxu0 %v96
  %5360 = vmatpush2.msra.mxu0 %v95
  %5361 = vmatprep.subr.mxu0 %v94
  %5362 = vmatpush2.msra.mxu0 %v93
  %5363 = vmatprep.subr.mxu0 %v92
  %5364 = vmatpush2.msra.mxu0 %v91
  %5365 = vmatprep.subr.mxu0 %v90
  %5366 = vmatpush2.msra.mxu0 %v89
  %5367 = vmatprep.subr.mxu0 %v88
  %5368 = vmatpush2.msra.mxu0 %v87
  %5369 = vmatprep.subr.mxu0 %v86
  %5370 = vmatpush2.msra.mxu0 %v85
  %5371 = vmatprep.subr.mxu0 %v84
  %5372 = vmatpush2.msra.mxu0 %v83
  %5373 = vmatprep.subr.mxu0 %v82
  %5374 = vmatpush2.msra.mxu0 %v81
  %5375 = vmatprep.subr.mxu0 %v80
  %5376 = vmatpush2.msra.mxu0 %v79
  %5377 = vmatprep.subr.mxu0 %v78
  %5378 = vmatpush2.msra.mxu0 %v77
  %5379 = vmatprep.subr.mxu0 %v76
  %5380 = vmatpush2.msra.mxu0 %v75
  %5381 = vmatprep.mubr.f32.mxu0 %v5308
  %5382 = vmatmul.mubr.f32.gmra.mxu0 %v5307
  %v5383 = vpop.f32.mrf.mxu0
  %v5384 = vadd.f32 0.0, %v5383
  %v5385 = vpop.f32.mrf.mxu0
  %v5386 = vadd.f32 0.0, %v5385
  %5387 = vdwg.mxu0
  %5388 = vmatprep.subr.mxu0 %v138
  %5389 = vmatpush1.msra.mxu0 %v137
  %5390 = vmatprep.subr.mxu0 %v136
  %5391 = vmatpush1.msra.mxu0 %v135
  %5392 = vmatprep.subr.mxu0 %v134
  %5393 = vmatpush1.msra.mxu0 %v133
  %5394 = vmatprep.subr.mxu0 %v132
  %5395 = vmatpush1.msra.mxu0 %v131
  %5396 = vmatprep.subr.mxu0 %v130
  %5397 = vmatpush1.msra.mxu0 %v129
  %5398 = vmatprep.subr.mxu0 %v128
  %5399 = vmatpush1.msra.mxu0 %v127
  %5400 = vmatprep.subr.mxu0 %v126
  %5401 = vmatpush1.msra.mxu0 %v125
  %5402 = vmatprep.subr.mxu0 %v124
  %5403 = vmatpush1.msra.mxu0 %v123
  %5404 = vmatprep.subr.mxu0 %v122
  %5405 = vmatpush1.msra.mxu0 %v121
  %5406 = vmatprep.subr.mxu0 %v120
  %5407 = vmatpush1.msra.mxu0 %v119
  %5408 = vmatprep.subr.mxu0 %v118
  %5409 = vmatpush1.msra.mxu0 %v117
  %5410 = vmatprep.subr.mxu0 %v116
  %5411 = vmatpush1.msra.mxu0 %v115
  %5412 = vmatprep.subr.mxu0 %v114
  %5413 = vmatpush1.msra.mxu0 %v113
  %5414 = vmatprep.subr.mxu0 %v112
  %5415 = vmatpush1.msra.mxu0 %v111
  %5416 = vmatprep.subr.mxu0 %v110
  %5417 = vmatpush1.msra.mxu0 %v109
  %5418 = vmatprep.subr.mxu0 %v108
  %5419 = vmatpush1.msra.mxu0 %v107
  %5420 = vmatprep.subr.mxu0 %v170
  %5421 = vmatpush2.msra.mxu0 %v169
  %5422 = vmatprep.subr.mxu0 %v168
  %5423 = vmatpush2.msra.mxu0 %v167
  %5424 = vmatprep.subr.mxu0 %v166
  %5425 = vmatpush2.msra.mxu0 %v165
  %5426 = vmatprep.subr.mxu0 %v164
  %5427 = vmatpush2.msra.mxu0 %v163
  %5428 = vmatprep.subr.mxu0 %v162
  %5429 = vmatpush2.msra.mxu0 %v161
  %5430 = vmatprep.subr.mxu0 %v160
  %5431 = vmatpush2.msra.mxu0 %v159
  %5432 = vmatprep.subr.mxu0 %v158
  %5433 = vmatpush2.msra.mxu0 %v157
  %5434 = vmatprep.subr.mxu0 %v156
  %5435 = vmatpush2.msra.mxu0 %v155
  %5436 = vmatprep.subr.mxu0 %v154
  %5437 = vmatpush2.msra.mxu0 %v153
  %5438 = vmatprep.subr.mxu0 %v152
  %5439 = vmatpush2.msra.mxu0 %v151
  %5440 = vmatprep.subr.mxu0 %v150
  %5441 = vmatpush2.msra.mxu0 %v149
  %5442 = vmatprep.subr.mxu0 %v148
  %5443 = vmatpush2.msra.mxu0 %v147
  %5444 = vmatprep.subr.mxu0 %v146
  %5445 = vmatpush2.msra.mxu0 %v145
  %5446 = vmatprep.subr.mxu0 %v144
  %5447 = vmatpush2.msra.mxu0 %v143
  %5448 = vmatprep.subr.mxu0 %v142
  %5449 = vmatpush2.msra.mxu0 %v141
  %5450 = vmatprep.subr.mxu0 %v140
  %5451 = vmatpush2.msra.mxu0 %v139
  %5452 = vmatprep.mubr.f32.mxu0 %v5310
  %5453 = vmatmul.mubr.f32.gmra.mxu0 %v5309
  %v5454 = vpop.f32.mrf.mxu0
  %v5455 = vadd.f32 %v5384, %v5454
  %v5456 = vpop.f32.mrf.mxu0
  %v5457 = vadd.f32 %v5386, %v5456
  %5458 = vdwg.mxu0
  %5459 = vmatprep.subr.mxu0 %v202
  %5460 = vmatpush1.msra.mxu0 %v201
  %5461 = vmatprep.subr.mxu0 %v200
  %5462 = vmatpush1.msra.mxu0 %v199
  %5463 = vmatprep.subr.mxu0 %v198
  %5464 = vmatpush1.msra.mxu0 %v197
  %5465 = vmatprep.subr.mxu0 %v196
  %5466 = vmatpush1.msra.mxu0 %v195
  %5467 = vmatprep.subr.mxu0 %v194
  %5468 = vmatpush1.msra.mxu0 %v193
  %5469 = vmatprep.subr.mxu0 %v192
  %5470 = vmatpush1.msra.mxu0 %v191
  %5471 = vmatprep.subr.mxu0 %v190
  %5472 = vmatpush1.msra.mxu0 %v189
  %5473 = vmatprep.subr.mxu0 %v188
  %5474 = vmatpush1.msra.mxu0 %v187
  %5475 = vmatprep.subr.mxu0 %v186
  %5476 = vmatpush1.msra.mxu0 %v185
  %5477 = vmatprep.subr.mxu0 %v184
  %5478 = vmatpush1.msra.mxu0 %v183
  %5479 = vmatprep.subr.mxu0 %v182
  %5480 = vmatpush1.msra.mxu0 %v181
  %5481 = vmatprep.subr.mxu0 %v180
  %5482 = vmatpush1.msra.mxu0 %v179
  %5483 = vmatprep.subr.mxu0 %v178
  %5484 = vmatpush1.msra.mxu0 %v177
  %5485 = vmatprep.subr.mxu0 %v176
  %5486 = vmatpush1.msra.mxu0 %v175
  %5487 = vmatprep.subr.mxu0 %v174
  %5488 = vmatpush1.msra.mxu0 %v173
  %5489 = vmatprep.subr.mxu0 %v172
  %5490 = vmatpush1.msra.mxu0 %v171
  %5491 = vmatprep.subr.mxu0 %v234
  %5492 = vmatpush2.msra.mxu0 %v233
  %5493 = vmatprep.subr.mxu0 %v232
  %5494 = vmatpush2.msra.mxu0 %v231
  %5495 = vmatprep.subr.mxu0 %v230
  %5496 = vmatpush2.msra.mxu0 %v229
  %5497 = vmatprep.subr.mxu0 %v228
  %5498 = vmatpush2.msra.mxu0 %v227
  %5499 = vmatprep.subr.mxu0 %v226
  %5500 = vmatpush2.msra.mxu0 %v225
  %5501 = vmatprep.subr.mxu0 %v224
  %5502 = vmatpush2.msra.mxu0 %v223
  %5503 = vmatprep.subr.mxu0 %v222
  %5504 = vmatpush2.msra.mxu0 %v221
  %5505 = vmatprep.subr.mxu0 %v220
  %5506 = vmatpush2.msra.mxu0 %v219
  %5507 = vmatprep.subr.mxu0 %v218
  %5508 = vmatpush2.msra.mxu0 %v217
  %5509 = vmatprep.subr.mxu0 %v216
  %5510 = vmatpush2.msra.mxu0 %v215
  %5511 = vmatprep.subr.mxu0 %v214
  %5512 = vmatpush2.msra.mxu0 %v213
  %5513 = vmatprep.subr.mxu0 %v212
  %5514 = vmatpush2.msra.mxu0 %v211
  %5515 = vmatprep.subr.mxu0 %v210
  %5516 = vmatpush2.msra.mxu0 %v209
  %5517 = vmatprep.subr.mxu0 %v208
  %5518 = vmatpush2.msra.mxu0 %v207
  %5519 = vmatprep.subr.mxu0 %v206
  %5520 = vmatpush2.msra.mxu0 %v205
  %5521 = vmatprep.subr.mxu0 %v204
  %5522 = vmatpush2.msra.mxu0 %v203
  %5523 = vmatprep.mubr.f32.mxu0 %v5312
  %5524 = vmatmul.mubr.f32.gmra.mxu0 %v5311
  %v5525 = vpop.f32.mrf.mxu0
  %v5526 = vadd.f32 %v5455, %v5525
  %v5527 = vpop.f32.mrf.mxu0
  %v5528 = vadd.f32 %v5457, %v5527
  %5529 = vdwg.mxu0
  %5530 = vmatprep.subr.mxu0 0.0
  %5531 = vmatpush1.msra.mxu0 0.0
  %5532 = vmatprep.subr.mxu0 0.0
  %5533 = vmatpush1.msra.mxu0 0.0
  %5534 = vmatprep.subr.mxu0 0.0
  %5535 = vmatpush1.msra.mxu0 0.0
  %5536 = vmatprep.subr.mxu0 0.0
  %5537 = vmatpush1.msra.mxu0 0.0
  %5538 = vmatprep.subr.mxu0 0.0
  %5539 = vmatpush1.msra.mxu0 0.0
  %5540 = vmatprep.subr.mxu0 0.0
  %5541 = vmatpush1.msra.mxu0 0.0
  %5542 = vmatprep.subr.mxu0 0.0
  %5543 = vmatpush1.msra.mxu0 0.0
  %5544 = vmatprep.subr.mxu0 0.0
  %5545 = vmatpush1.msra.mxu0 0.0
  %5546 = vmatprep.subr.mxu0 0.0
  %5547 = vmatpush1.msra.mxu0 0.0
  %5548 = vmatprep.subr.mxu0 0.0
  %5549 = vmatpush1.msra.mxu0 0.0
  %5550 = vmatprep.subr.mxu0 0.0
  %5551 = vmatpush1.msra.mxu0 0.0
  %5552 = vmatprep.subr.mxu0 0.0
  %5553 = vmatpush1.msra.mxu0 0.0
  %5554 = vmatprep.subr.mxu0 0.0
  %5555 = vmatpush1.msra.mxu0 0.0
  %5556 = vmatprep.subr.mxu0 0.0
  %5557 = vmatpush1.msra.mxu0 0.0
  %5558 = vmatprep.subr.mxu0 %v238
  %5559 = vmatpush1.msra.mxu0 %v237
  %5560 = vmatprep.subr.mxu0 %v236
  %5561 = vmatpush1.msra.mxu0 %v235
  %5562 = vmatprep.subr.mxu0 0.0
  %5563 = vmatpush2.msra.mxu0 0.0
  %5564 = vmatprep.subr.mxu0 0.0
  %5565 = vmatpush2.msra.mxu0 0.0
  %5566 = vmatprep.subr.mxu0 0.0
  %5567 = vmatpush2.msra.mxu0 0.0
  %5568 = vmatprep.subr.mxu0 0.0
  %5569 = vmatpush2.msra.mxu0 0.0
  %5570 = vmatprep.subr.mxu0 0.0
  %5571 = vmatpush2.msra.mxu0 0.0
  %5572 = vmatprep.subr.mxu0 0.0
  %5573 = vmatpush2.msra.mxu0 0.0
  %5574 = vmatprep.subr.mxu0 0.0
  %5575 = vmatpush2.msra.mxu0 0.0
  %5576 = vmatprep.subr.mxu0 0.0
  %5577 = vmatpush2.msra.mxu0 0.0
  %5578 = vmatprep.subr.mxu0 0.0
  %5579 = vmatpush2.msra.mxu0 0.0
  %5580 = vmatprep.subr.mxu0 0.0
  %5581 = vmatpush2.msra.mxu0 0.0
  %5582 = vmatprep.subr.mxu0 0.0
  %5583 = vmatpush2.msra.mxu0 0.0
  %5584 = vmatprep.subr.mxu0 0.0
  %5585 = vmatpush2.msra.mxu0 0.0
  %5586 = vmatprep.subr.mxu0 0.0
  %5587 = vmatpush2.msra.mxu0 0.0
  %5588 = vmatprep.subr.mxu0 0.0
  %5589 = vmatpush2.msra.mxu0 0.0
  %5590 = vmatprep.subr.mxu0 0.0
  %5591 = vmatpush2.msra.mxu0 0.0
  %5592 = vmatprep.subr.mxu0 0.0
  %5593 = vmatpush2.msra.mxu0 0.0
  %5594 = vmatprep.mubr.f32.mxu0 0.0
  %5595 = vmatmul.mubr.f32.gmra.mxu0 %v5315
  %v5596 = vpop.f32.mrf.mxu0
  %v5597 = vadd.f32 %v5526, %v5596
  %v5598 = vpop.f32.mrf.mxu0
  %v5599 = vadd.f32 %v5528, %v5598
  %5600 = vdwg.mxu0
  %v5603 = vrot.slane %v1583, 7
  %v5604 = vrot.slane %v1585, 7
  %v5609 = vrot.slane %v2252, 6
  %v5610 = vrot.slane %v2254, 6
  %v5615 = vrot.slane %v2921, 5
  %v5616 = vrot.slane %v2923, 5
  %v5621 = vrot.slane %v3590, 4
  %v5622 = vrot.slane %v3592, 4
  %v5627 = vrot.slane %v4259, 3
  %v5628 = vrot.slane %v4261, 3
  %v5633 = vrot.slane %v4928, 2
  %v5634 = vrot.slane %v4930, 2
  %v5639 = vrot.slane %v5597, 1
  %v5640 = vrot.slane %v5599, 1
  %vm5643 = vcmask 1040384
  %v5644 = vsel %vm5643, %v914, %v5603
  %v5645 = vsel %vm5643, %v916, %v5604
  %vm5646 = vcmask 1041408
  %v5647 = vsel %vm5646, %v5644, %v5609
  %v5648 = vsel %vm5646, %v5645, %v5610
  %v5649 = vsel %vm318, %v5647, %v5615
  %v5650 = vsel %vm318, %v5648, %v5616
  %vm5651 = vcmask 1043456
  %v5652 = vsel %vm5651, %v5649, %v5621
  %v5653 = vsel %vm5651, %v5650, %v5622
  %vm5654 = vcmask 1044480
  %v5655 = vsel %vm5654, %v5652, %v5627
  %v5656 = vsel %vm5654, %v5653, %v5628
  %vm5657 = vcmask 1045504
  %v5658 = vsel %vm5657, %v5655, %v5633
  %v5659 = vsel %vm5657, %v5656, %v5634
  %vm5660 = vcmask 1046528
  %v5661 = vsel %vm5660, %v5658, %v5639
  %v5662 = vsel %vm5660, %v5659, %v5640
  %v5663 = vld [vmem:[%s4] sm:$0xff]
  %v5664 = vld [vmem:[%s4 + $0x8] sm:$0xff]
  %v5665 = vld [vmem:[%s4 + $0x10] sm:$0xff]
  %v5666 = vld [vmem:[%s4 + $0x18] sm:$0xff]
  %v5667 = vld [vmem:[%s4 + $0x20] sm:$0xff]
  %v5668 = vld [vmem:[%s4 + $0x28] sm:$0xff]
  %v5669 = vld [vmem:[%s4 + $0x30] sm:$0xff]
  %v5670 = vld [vmem:[%s4 + $0x38] sm:$0xff]
  %v5671 = vld [vmem:[%s4 + $0x40] sm:$0xff]
  %v5672 = vld [vmem:[%s4 + $0x48] sm:$0xff]
  %v5673 = vld [vmem:[%s4 + $0x50] sm:$0xff]
  %v5674 = vld [vmem:[%s4 + $0x58] sm:$0xff]
  %v5675 = vld [vmem:[%s4 + $0x60] sm:$0xff]
  %v5676 = vld [vmem:[%s4 + $0x68] sm:$0xff]
  %v5677 = vld [vmem:[%s4 + $0x70] sm:$0xff]
  %v5678 = vld [vmem:[%s4 + $0x78] sm:$0xff]
  %v5679 = vld [vmem:[%s4 + $0x80] sm:$0xff]
  %v5680 = vld [vmem:[%s4 + $0x88] sm:$0xff]
  %v5681 = vld [vmem:[%s4 + $0x90] sm:$0xff]
  %v5682 = vld [vmem:[%s4 + $0x98] sm:$0xff]
  %v5683 = vld [vmem:[%s4 + $0xa0] sm:$0xff]
  %v5684 = vld [vmem:[%s4 + $0xa8] sm:$0xff]
  %v5685 = vld [vmem:[%s4 + $0xb0] sm:$0xff]
  %v5686 = vld [vmem:[%s4 + $0xb8] sm:$0xff]
  %v5687 = vld [vmem:[%s4 + $0xc0] sm:$0xff]
  %v5688 = vld [vmem:[%s4 + $0xc8] sm:$0xff]
  %v5689 = vld [vmem:[%s4 + $0xd0] sm:$0xff]
  %v5690 = vld [vmem:[%s4 + $0xd8] sm:$0xff]
  %v5691 = vld [vmem:[%s4 + $0xe0] sm:$0xff]
  %v5692 = vld [vmem:[%s4 + $0xe8] sm:$0xff]
  %v5693 = vld [vmem:[%s4 + $0xf0] sm:$0xff]
  %v5694 = vld [vmem:[%s4 + $0xf8] sm:$0xff]
  %v5695 = vld [vmem:[%s4 + $0x100] sm:$0xff]
  %v5696 = vld [vmem:[%s4 + $0x108] sm:$0xff]
  %v5697 = vld [vmem:[%s4 + $0x110] sm:$0xff]
  %v5698 = vld [vmem:[%s4 + $0x118] sm:$0xff]
  %v5699 = vld [vmem:[%s4 + $0x120] sm:$0xff]
  %v5700 = vld [vmem:[%s4 + $0x128] sm:$0xff]
  %v5701 = vld [vmem:[%s4 + $0x130] sm:$0xff]
  %v5702 = vld [vmem:[%s4 + $0x138] sm:$0xff]
  %v5703 = vld [vmem:[%s4 + $0x140] sm:$0xff]
  %v5704 = vld [vmem:[%s4 + $0x148] sm:$0xff]
  %v5705 = vld [vmem:[%s4 + $0x150] sm:$0xff]
  %v5706 = vld [vmem:[%s4 + $0x158] sm:$0xff]
  %v5707 = vld [vmem:[%s4 + $0x160] sm:$0xff]
  %v5708 = vld [vmem:[%s4 + $0x168] sm:$0xff]
  %v5709 = vld [vmem:[%s4 + $0x170] sm:$0xff]
  %v5710 = vld [vmem:[%s4 + $0x178] sm:$0xff]
  %v5711 = vld [vmem:[%s4 + $0x180] sm:$0xff]
  %v5712 = vld [vmem:[%s4 + $0x188] sm:$0xff]
  %v5713 = vld [vmem:[%s4 + $0x190] sm:$0xff]
  %v5714 = vld [vmem:[%s4 + $0x198] sm:$0xff]
  %v5715 = vld [vmem:[%s4 + $0x1a0] sm:$0xff]
  %v5716 = vld [vmem:[%s4 + $0x1a8] sm:$0xff]
  %v5717 = vld [vmem:[%s4 + $0x1b0] sm:$0xff]
  %v5718 = vld [vmem:[%s4 + $0x1b8] sm:$0xff]
  %v5719 = vld [vmem:[%s4 + $0x1c0] sm:$0xff]
  %v5720 = vld [vmem:[%s4 + $0x1c8] sm:$0xff]
  %v5721 = vld [vmem:[%s4 + $0x1d0] sm:$0xff]
  %v5722 = vld [vmem:[%s4 + $0x1d8] sm:$0xff]
  %v5723 = vld [vmem:[%s4 + $0x1e0] sm:$0xff]
  %v5724 = vld [vmem:[%s4 + $0x1e8] sm:$0xff]
  %v5725 = vld [vmem:[%s4 + $0x1f0] sm:$0xff]
  %v5726 = vld [vmem:[%s4 + $0x1f8] sm:$0xff]
  %v5727 = vld [vmem:[%s4 + $0x200] sm:$0xff]
  %v5728 = vld [vmem:[%s4 + $0x208] sm:$0xff]
  %v5729 = vld [vmem:[%s4 + $0x210] sm:$0xff]
  %v5730 = vld [vmem:[%s4 + $0x218] sm:$0xff]
  %v5731 = vld [vmem:[%s4 + $0x220] sm:$0xff]
  %v5732 = vld [vmem:[%s4 + $0x228] sm:$0xff]
  %v5733 = vld [vmem:[%s4 + $0x230] sm:$0xff]
  %v5734 = vld [vmem:[%s4 + $0x238] sm:$0xff]
  %v5735 = vld [vmem:[%s4 + $0x240] sm:$0xff]
  %v5736 = vld [vmem:[%s4 + $0x248] sm:$0xff]
  %v5737 = vld [vmem:[%s4 + $0x250] sm:$0xff]
  %v5738 = vld [vmem:[%s4 + $0x258] sm:$0xff]
  %v5739 = vld [vmem:[%s4 + $0x260] sm:$0xff]
  %v5740 = vld [vmem:[%s4 + $0x268] sm:$0xff]
  %v5741 = vld [vmem:[%s4 + $0x270] sm:$0xff]
  %v5742 = vld [vmem:[%s4 + $0x278] sm:$0xff]
  %v5743 = vld [vmem:[%s4 + $0x280] sm:$0xff]
  %v5744 = vld [vmem:[%s4 + $0x288] sm:$0xff]
  %v5745 = vld [vmem:[%s4 + $0x290] sm:$0xff]
  %v5746 = vld [vmem:[%s4 + $0x298] sm:$0xff]
  %v5747 = vld [vmem:[%s4 + $0x2a0] sm:$0xff]
  %v5748 = vld [vmem:[%s4 + $0x2a8] sm:$0xff]
  %v5749 = vld [vmem:[%s4 + $0x2b0] sm:$0xff]
  %v5750 = vld [vmem:[%s4 + $0x2b8] sm:$0xff]
  %v5751 = vld [vmem:[%s4 + $0x2c0] sm:$0xff]
  %v5752 = vld [vmem:[%s4 + $0x2c8] sm:$0xff]
  %v5753 = vld [vmem:[%s4 + $0x2d0] sm:$0xff]
  %v5754 = vld [vmem:[%s4 + $0x2d8] sm:$0xff]
  %v5755 = vld [vmem:[%s4 + $0x2e0] sm:$0xff]
  %v5756 = vld [vmem:[%s4 + $0x2e8] sm:$0xff]
  %v5757 = vld [vmem:[%s4 + $0x2f0] sm:$0xff]
  %v5758 = vld [vmem:[%s4 + $0x2f8] sm:$0xff]
  %v5759 = vld [vmem:[%s4 + $0x300] sm:$0xff]
  %v5760 = vld [vmem:[%s4 + $0x308] sm:$0xff]
  %v5761 = vld [vmem:[%s4 + $0x310] sm:$0xff]
  %v5762 = vld [vmem:[%s4 + $0x318] sm:$0xff]
  %v5763 = vld [vmem:[%s4 + $0x320] sm:$0xff]
  %v5764 = vld [vmem:[%s4 + $0x328] sm:$0xff]
  %v5765 = vld [vmem:[%s4 + $0x330] sm:$0xff]
  %v5766 = vld [vmem:[%s4 + $0x338] sm:$0xff]
  %v5767 = vld [vmem:[%s4 + $0x340] sm:$0xff]
  %v5768 = vld [vmem:[%s4 + $0x348] sm:$0xff]
  %v5769 = vld [vmem:[%s4 + $0x350] sm:$0xff]
  %v5770 = vld [vmem:[%s4 + $0x358] sm:$0xff]
  %v5771 = vld [vmem:[%s4 + $0x360] sm:$0xff]
  %v5772 = vld [vmem:[%s4 + $0x368] sm:$0xff]
  %v5773 = vld [vmem:[%s4 + $0x370] sm:$0xff]
  %v5774 = vld [vmem:[%s4 + $0x378] sm:$0xff]
  %v5775 = vld [vmem:[%s4 + $0x380] sm:$0xff]
  %v5776 = vld [vmem:[%s4 + $0x388] sm:$0xff]
  %v5777 = vld [vmem:[%s4 + $0x390] sm:$0xff]
  %v5778 = vld [vmem:[%s4 + $0x398] sm:$0xff]
  %v5779 = vld [vmem:[%s4 + $0x3a0] sm:$0xff]
  %v5780 = vld [vmem:[%s4 + $0x3a8] sm:$0xff]
  %v5781 = vld [vmem:[%s4 + $0x3b0] sm:$0xff]
  %v5782 = vld [vmem:[%s4 + $0x3b8] sm:$0xff]
  %v5783 = vld [vmem:[%s4 + $0x3c0] sm:$0xff]
  %v5784 = vld [vmem:[%s4 + $0x3c8] sm:$0xff]
  %v5785 = vld [vmem:[%s4 + $0x3d0] sm:$0xff]
  %v5786 = vld [vmem:[%s4 + $0x3d8] sm:$0xff]
  %v5787 = vld [vmem:[%s4 + $0x3e0] sm:$0xff]
  %v5788 = vld [vmem:[%s4 + $0x3e8] sm:$0xff]
  %v5789 = vld [vmem:[%s4 + $0x3f0] sm:$0xff]
  %v5790 = vld [vmem:[%s4 + $0x3f8] sm:$0xff]
  %v5791 = vld [vmem:[%s4 + $0x400] sm:$0xff]
  %v5792 = vld [vmem:[%s4 + $0x408] sm:$0xff]
  %v5793 = vld [vmem:[%s4 + $0x410] sm:$0xff]
  %v5794 = vld [vmem:[%s4 + $0x418] sm:$0xff]
  %v5795 = vld [vmem:[%s4 + $0x420] sm:$0xff]
  %v5796 = vld [vmem:[%s4 + $0x428] sm:$0xff]
  %v5797 = vld [vmem:[%s4 + $0x430] sm:$0xff]
  %v5798 = vld [vmem:[%s4 + $0x438] sm:$0xff]
  %v5799 = vld [vmem:[%s4 + $0x440] sm:$0xff]
  %v5800 = vld [vmem:[%s4 + $0x448] sm:$0xff]
  %v5801 = vld [vmem:[%s4 + $0x450] sm:$0xff]
  %v5802 = vld [vmem:[%s4 + $0x458] sm:$0xff]
  %v5803 = vld [vmem:[%s4 + $0x460] sm:$0xff]
  %v5804 = vld [vmem:[%s4 + $0x468] sm:$0xff]
  %v5805 = vld [vmem:[%s4 + $0x470] sm:$0xff]
  %v5806 = vld [vmem:[%s4 + $0x478] sm:$0xff]
  %v5807 = vld [vmem:[%s4 + $0x480] sm:$0xff]
  %v5808 = vld [vmem:[%s4 + $0x488] sm:$0xff]
  %v5809 = vld [vmem:[%s4 + $0x490] sm:$0xff]
  %v5810 = vld [vmem:[%s4 + $0x498] sm:$0xff]
  %v5811 = vld [vmem:[%s4 + $0x4a0] sm:$0xff]
  %v5812 = vld [vmem:[%s4 + $0x4a8] sm:$0xff]
  %v5813 = vld [vmem:[%s4 + $0x4b0] sm:$0xff]
  %v5814 = vld [vmem:[%s4 + $0x4b8] sm:$0xff]
  %v5815 = vld [vmem:[%s4 + $0x4c0] sm:$0xff]
  %v5816 = vld [vmem:[%s4 + $0x4c8] sm:$0xff]
  %v5817 = vld [vmem:[%s4 + $0x4d0] sm:$0xff]
  %v5818 = vld [vmem:[%s4 + $0x4d8] sm:$0xff]
  %v5819 = vld [vmem:[%s4 + $0x4e0] sm:$0xff]
  %v5820 = vld [vmem:[%s4 + $0x4e8] sm:$0xff]
  %v5821 = vld [vmem:[%s4 + $0x4f0] sm:$0xff]
  %v5822 = vld [vmem:[%s4 + $0x4f8] sm:$0xff]
  %v5823 = vld [vmem:[%s4 + $0x500] sm:$0xff]
  %v5824 = vld [vmem:[%s4 + $0x508] sm:$0xff]
  %v5825 = vld [vmem:[%s4 + $0x510] sm:$0xff]
  %v5826 = vld [vmem:[%s4 + $0x518] sm:$0xff]
  %v5827 = vld [vmem:[%s4 + $0x520] sm:$0xff]
  %v5828 = vld [vmem:[%s4 + $0x528] sm:$0xff]
  %v5829 = vld [vmem:[%s4 + $0x530] sm:$0xff]
  %v5830 = vld [vmem:[%s4 + $0x538] sm:$0xff]
  %v5831 = vld [vmem:[%s4 + $0x540] sm:$0xff]
  %v5832 = vld [vmem:[%s4 + $0x548] sm:$0xff]
  %v5833 = vld [vmem:[%s4 + $0x550] sm:$0xff]
  %v5834 = vld [vmem:[%s4 + $0x558] sm:$0xff]
  %v5835 = vld [vmem:[%s4 + $0x560] sm:$0xff]
  %v5836 = vld [vmem:[%s4 + $0x568] sm:$0xff]
  %v5837 = vld [vmem:[%s4 + $0x570] sm:$0xff]
  %v5838 = vld [vmem:[%s4 + $0x578] sm:$0xff]
  %v5839 = vld [vmem:[%s4 + $0x580] sm:$0xff]
  %v5840 = vld [vmem:[%s4 + $0x588] sm:$0xff]
  %v5841 = vld [vmem:[%s4 + $0x590] sm:$0xff]
  %v5842 = vld [vmem:[%s4 + $0x598] sm:$0xff]
  %v5843 = vld [vmem:[%s4 + $0x5a0] sm:$0xff]
  %v5844 = vld [vmem:[%s4 + $0x5a8] sm:$0xff]
  %v5845 = vld [vmem:[%s4 + $0x5b0] sm:$0xff]
  %v5846 = vld [vmem:[%s4 + $0x5b8] sm:$0xff]
  %v5847 = vld [vmem:[%s4 + $0x5c0] sm:$0xff]
  %v5848 = vld [vmem:[%s4 + $0x5c8] sm:$0xff]
  %v5849 = vld [vmem:[%s4 + $0x5d0] sm:$0xff]
  %v5850 = vld [vmem:[%s4 + $0x5d8] sm:$0xff]
  %v5851 = vld [vmem:[%s4 + $0x5e0] sm:$0xff]
  %v5852 = vld [vmem:[%s4 + $0x5e8] sm:$0xff]
  %v5853 = vld [vmem:[%s4 + $0x5f0] sm:$0xff]
  %v5854 = vld [vmem:[%s4 + $0x5f8] sm:$0xff]
  %v5855 = vld [vmem:[%s4 + $0x600] sm:$0xff]
  %v5856 = vld [vmem:[%s4 + $0x608] sm:$0xff]
  %v5857 = vld [vmem:[%s4 + $0x610] sm:$0xff]
  %v5858 = vld [vmem:[%s4 + $0x618] sm:$0xff]
  %v5859 = vld [vmem:[%s4 + $0x620] sm:$0xff]
  %v5860 = vld [vmem:[%s4 + $0x628] sm:$0xff]
  %v5861 = vld [vmem:[%s4 + $0x630] sm:$0xff]
  %v5862 = vld [vmem:[%s4 + $0x638] sm:$0xff]
  %v5863 = vld [vmem:[%s4 + $0x640] sm:$0xff]
  %v5864 = vld [vmem:[%s4 + $0x648] sm:$0xff]
  %v5865 = vld [vmem:[%s4 + $0x650] sm:$0xff]
  %v5866 = vld [vmem:[%s4 + $0x658] sm:$0xff]
  %v5867 = vld [vmem:[%s4 + $0x660] sm:$0xff]
  %v5868 = vld [vmem:[%s4 + $0x668] sm:$0xff]
  %v5869 = vld [vmem:[%s4 + $0x670] sm:$0xff]
  %v5870 = vld [vmem:[%s4 + $0x678] sm:$0xff]
  %v5871 = vld [vmem:[%s4 + $0x680] sm:$0xff]
  %v5872 = vld [vmem:[%s4 + $0x688] sm:$0xff]
  %v5873 = vld [vmem:[%s4 + $0x690] sm:$0xff]
  %v5874 = vld [vmem:[%s4 + $0x698] sm:$0xff]
  %v5875 = vld [vmem:[%s4 + $0x6a0] sm:$0xff]
  %v5876 = vld [vmem:[%s4 + $0x6a8] sm:$0xff]
  %v5877 = vld [vmem:[%s4 + $0x6b0] sm:$0xff]
  %v5878 = vld [vmem:[%s4 + $0x6b8] sm:$0xff]
  %v5879 = vld [vmem:[%s4 + $0x6c0] sm:$0xff]
  %v5880 = vld [vmem:[%s4 + $0x6c8] sm:$0xff]
  %v5881 = vld [vmem:[%s4 + $0x6d0] sm:$0xff]
  %v5882 = vld [vmem:[%s4 + $0x6d8] sm:$0xff]
  %v5883 = vld [vmem:[%s4 + $0x6e0] sm:$0xff]
  %v5884 = vld [vmem:[%s4 + $0x6e8] sm:$0xff]
  %v5885 = vld [vmem:[%s4 + $0x6f0] sm:$0xff]
  %v5886 = vld [vmem:[%s4 + $0x6f8] sm:$0xff]
  %v5887 = vld [vmem:[%s4 + $0x700] sm:$0xff]
  %v5888 = vld [vmem:[%s4 + $0x708] sm:$0xff]
  %v5889 = vld [vmem:[%s4 + $0x710] sm:$0xff]
  %v5890 = vld [vmem:[%s4 + $0x718] sm:$0xff]
  %v5891 = vld [vmem:[%s4 + $0x720] sm:$0xff]
  %v5892 = vld [vmem:[%s4 + $0x728] sm:$0xff]
  %v5893 = vld [vmem:[%s4 + $0x730] sm:$0xff]
  %v5894 = vld [vmem:[%s4 + $0x738] sm:$0xff]
  %v5895 = vld [vmem:[%s4 + $0x740] sm:$0xff]
  %v5896 = vld [vmem:[%s4 + $0x748] sm:$0xff]
  %v5897 = vld [vmem:[%s4 + $0x750] sm:$0xff]
  %v5898 = vld [vmem:[%s4 + $0x758] sm:$0xff]
  %v5899 = vld [vmem:[%s4 + $0x760] sm:$0xff]
  %v5900 = vld [vmem:[%s4 + $0x768] sm:$0xff]
  %v5901 = vld [vmem:[%s4 + $0x770] sm:$0xff]
  %v5902 = vld [vmem:[%s4 + $0x778] sm:$0xff]
  %v5903 = vld [vmem:[%s4 + $0x780] sm:$0xff]
  %v5904 = vld [vmem:[%s4 + $0x788] sm:$0xff]
  %v5905 = vld [vmem:[%s4 + $0x790] sm:$0xff]
  %v5906 = vld [vmem:[%s4 + $0x798] sm:$0xff]
  %v5907 = vld [vmem:[%s4 + $0x7a0] sm:$0xff]
  %v5908 = vld [vmem:[%s4 + $0x7a8] sm:$0xff]
  %v5909 = vld [vmem:[%s4 + $0x7b0] sm:$0xff]
  %v5910 = vld [vmem:[%s4 + $0x7b8] sm:$0xff]
  %v5911 = vld [vmem:[%s4 + $0x7c0] sm:$0xff]
  %v5912 = vld [vmem:[%s4 + $0x7c8] sm:$0xff]
  %v5913 = vld [vmem:[%s4 + $0x7d0] sm:$0xff]
  %v5914 = vld [vmem:[%s4 + $0x7d8] sm:$0xff]
  %v5915 = vld [vmem:[%s4 + $0x7e0] sm:$0xff]
  %v5916 = vld [vmem:[%s4 + $0x7e8] sm:$0xff]
  %v5917 = vld [vmem:[%s4 + $0x7f0] sm:$0xff]
  %v5918 = vld [vmem:[%s4 + $0x7f8] sm:$0xff]
  %v5919 = vld [vmem:[%s4 + $0x800] sm:$0xff]
  %v5920 = vld [vmem:[%s4 + $0x808] sm:$0xff]
  %v5921 = vld [vmem:[%s4 + $0x810] sm:$0xff]
  %v5922 = vld [vmem:[%s4 + $0x818] sm:$0xff]
  %v5923 = vld [vmem:[%s4 + $0x820] sm:$0xff]
  %v5924 = vld [vmem:[%s4 + $0x828] sm:$0xff]
  %v5925 = vld [vmem:[%s4 + $0x830] sm:$0xff]
  %v5926 = vld [vmem:[%s4 + $0x838] sm:$0xff]
  %v5927 = vld [vmem:[%s4 + $0x840] sm:$0xff]
  %v5928 = vld [vmem:[%s4 + $0x848] sm:$0xff]
  %v5929 = vld [vmem:[%s4 + $0x850] sm:$0xff]
  %v5930 = vld [vmem:[%s4 + $0x858] sm:$0xff]
  %v5931 = vld [vmem:[%s4 + $0x860] sm:$0xff]
  %v5932 = vld [vmem:[%s4 + $0x868] sm:$0xff]
  %v5933 = vld [vmem:[%s4 + $0x870] sm:$0xff]
  %v5934 = vld [vmem:[%s4 + $0x878] sm:$0xff]
  %v5935 = vld [vmem:[%s4 + $0x880] sm:$0xff]
  %v5936 = vld [vmem:[%s4 + $0x888] sm:$0xff]
  %v5937 = vld [vmem:[%s4 + $0x890] sm:$0xff]
  %v5938 = vld [vmem:[%s4 + $0x898] sm:$0xff]
  %v5939 = vld [vmem:[%s4 + $0x8a0] sm:$0xff]
  %v5940 = vld [vmem:[%s4 + $0x8a8] sm:$0xff]
  %v5941 = vld [vmem:[%s4 + $0x8b0] sm:$0xff]
  %v5942 = vld [vmem:[%s4 + $0x8b8] sm:$0xff]
  %v5943 = vld [vmem:[%s4 + $0x8c0] sm:$0xff]
  %v5944 = vld [vmem:[%s4 + $0x8c8] sm:$0xff]
  %v5945 = vld [vmem:[%s4 + $0x8d0] sm:$0xff]
  %v5946 = vld [vmem:[%s4 + $0x8d8] sm:$0xff]
  %v5947 = vld [vmem:[%s4 + $0x8e0] sm:$0xff]
  %v5948 = vld [vmem:[%s4 + $0x8e8] sm:$0xff]
  %v5949 = vld [vmem:[%s4 + $0x8f0] sm:$0xff]
  %v5950 = vld [vmem:[%s4 + $0x8f8] sm:$0xff]
  %v5951 = vld [vmem:[%s4 + $0x900] sm:$0xff]
  %v5952 = vld [vmem:[%s4 + $0x908] sm:$0xff]
  %v5953 = vld [vmem:[%s4 + $0x910] sm:$0xff]
  %v5954 = vld [vmem:[%s4 + $0x918] sm:$0xff]
  %v5955 = vld [vmem:[%s4 + $0x920] sm:$0xff]
  %v5956 = vld [vmem:[%s4 + $0x928] sm:$0xff]
  %v5957 = vld [vmem:[%s4 + $0x930] sm:$0xff]
  %v5958 = vld [vmem:[%s4 + $0x938] sm:$0xff]
  %v5959 = vld [vmem:[%s4 + $0x940] sm:$0xff]
  %v5960 = vld [vmem:[%s4 + $0x948] sm:$0xff]
  %v5961 = vld [vmem:[%s4 + $0x950] sm:$0xff]
  %v5962 = vld [vmem:[%s4 + $0x958] sm:$0xff]
  %v5963 = vld [vmem:[%s4 + $0x960] sm:$0xff]
  %v5964 = vld [vmem:[%s4 + $0x968] sm:$0xff]
  %v5965 = vld [vmem:[%s4 + $0x970] sm:$0xff]
  %v5966 = vld [vmem:[%s4 + $0x978] sm:$0xff]
  %v5967 = vld [vmem:[%s4 + $0x980] sm:$0xff]
  %v5968 = vld [vmem:[%s4 + $0x988] sm:$0xff]
  %v5969 = vld [vmem:[%s4 + $0x990] sm:$0xff]
  %v5970 = vld [vmem:[%s4 + $0x998] sm:$0xff]
  %v5971 = vld [vmem:[%s4 + $0x9a0] sm:$0xff]
  %v5972 = vld [vmem:[%s4 + $0x9a8] sm:$0xff]
  %v5973 = vld [vmem:[%s4 + $0x9b0] sm:$0xff]
  %v5974 = vld [vmem:[%s4 + $0x9b8] sm:$0xff]
  %v5975 = vld [vmem:[%s4 + $0x9c0] sm:$0xf]
  %v5976 = vld [vmem:[%s4 + $0x9c8] sm:$0xf]
  %v5977 = vld [vmem:[%s4 + $0x9d0] sm:$0xf]
  %v5978 = vld [vmem:[%s4 + $0x9d8] sm:$0xf]
  %v5979 = vld [vmem:[%s4 + $0x9e0] sm:$0xf]
  %v5980 = vld [vmem:[%s4 + $0x9e8] sm:$0xf]
  %v5981 = vld [vmem:[%s4 + $0x9f0] sm:$0xf]
  %v5982 = vld [vmem:[%s4 + $0x9f8] sm:$0xf]
  %v5983 = vld [vmem:[%s4 + $0xa00] sm:$0xf]
  %v5984 = vld [vmem:[%s4 + $0xa08] sm:$0xf]
  %v5985 = vld [vmem:[%s4 + $0xa10] sm:$0xf]
  %v5986 = vld [vmem:[%s4 + $0xa18] sm:$0xf]
  %v5987 = vld [vmem:[%s4 + $0xa20] sm:$0xf]
  %v5990 = vrot.slane %v914, 1
  %v5991 = vrot.slane %v916, 1
  %v5994 = vrot.slane %v2252, 7
  %v5995 = vrot.slane %v2254, 7
  %v5998 = vrot.slane %v2921, 6
  %v5999 = vrot.slane %v2923, 6
  %v6002 = vrot.slane %v3590, 5
  %v6003 = vrot.slane %v3592, 5
  %v6006 = vrot.slane %v4259, 4
  %v6007 = vrot.slane %v4261, 4
  %v6010 = vrot.slane %v4928, 3
  %v6011 = vrot.slane %v4930, 3
  %v6014 = vrot.slane %v5597, 2
  %v6015 = vrot.slane %v5599, 2
  %v6018 = vsel %vm5643, %v5990, %v1583
  %v6019 = vsel %vm5643, %v5991, %v1585
  %v6020 = vsel %vm5646, %v6018, %v5994
  %v6021 = vsel %vm5646, %v6019, %v5995
  %v6022 = vsel %vm318, %v6020, %v5998
  %v6023 = vsel %vm318, %v6021, %v5999
  %v6024 = vsel %vm5651, %v6022, %v6002
  %v6025 = vsel %vm5651, %v6023, %v6003
  %v6026 = vsel %vm5654, %v6024, %v6006
  %v6027 = vsel %vm5654, %v6025, %v6007
  %v6028 = vsel %vm5657, %v6026, %v6010
  %v6029 = vsel %vm5657, %v6027, %v6011
  %v6030 = vsel %vm5660, %v6028, %v6014
  %v6031 = vsel %vm5660, %v6029, %v6015
  %s6032 = scalar_lea.vmem %s4, 2600
  %v6033 = vld [vmem:[%s6032] sm:$0xff]
  %v6034 = vld [vmem:[%s6032 + $0x8] sm:$0xff]
  %v6035 = vld [vmem:[%s6032 + $0x10] sm:$0xff]
  %v6036 = vld [vmem:[%s6032 + $0x18] sm:$0xff]
  %v6037 = vld [vmem:[%s6032 + $0x20] sm:$0xff]
  %v6038 = vld [vmem:[%s6032 + $0x28] sm:$0xff]
  %v6039 = vld [vmem:[%s6032 + $0x30] sm:$0xff]
  %v6040 = vld [vmem:[%s6032 + $0x38] sm:$0xff]
  %v6041 = vld [vmem:[%s6032 + $0x40] sm:$0xff]
  %v6042 = vld [vmem:[%s6032 + $0x48] sm:$0xff]
  %v6043 = vld [vmem:[%s6032 + $0x50] sm:$0xff]
  %v6044 = vld [vmem:[%s6032 + $0x58] sm:$0xff]
  %v6045 = vld [vmem:[%s6032 + $0x60] sm:$0xff]
  %v6046 = vld [vmem:[%s6032 + $0x68] sm:$0xff]
  %v6047 = vld [vmem:[%s6032 + $0x70] sm:$0xff]
  %v6048 = vld [vmem:[%s6032 + $0x78] sm:$0xff]
  %v6049 = vld [vmem:[%s6032 + $0x80] sm:$0xff]
  %v6050 = vld [vmem:[%s6032 + $0x88] sm:$0xff]
  %v6051 = vld [vmem:[%s6032 + $0x90] sm:$0xff]
  %v6052 = vld [vmem:[%s6032 + $0x98] sm:$0xff]
  %v6053 = vld [vmem:[%s6032 + $0xa0] sm:$0xff]
  %v6054 = vld [vmem:[%s6032 + $0xa8] sm:$0xff]
  %v6055 = vld [vmem:[%s6032 + $0xb0] sm:$0xff]
  %v6056 = vld [vmem:[%s6032 + $0xb8] sm:$0xff]
  %v6057 = vld [vmem:[%s6032 + $0xc0] sm:$0xff]
  %v6058 = vld [vmem:[%s6032 + $0xc8] sm:$0xff]
  %v6059 = vld [vmem:[%s6032 + $0xd0] sm:$0xff]
  %v6060 = vld [vmem:[%s6032 + $0xd8] sm:$0xff]
  %v6061 = vld [vmem:[%s6032 + $0xe0] sm:$0xff]
  %v6062 = vld [vmem:[%s6032 + $0xe8] sm:$0xff]
  %v6063 = vld [vmem:[%s6032 + $0xf0] sm:$0xff]
  %v6064 = vld [vmem:[%s6032 + $0xf8] sm:$0xff]
  %v6065 = vld [vmem:[%s6032 + $0x100] sm:$0xff]
  %v6066 = vld [vmem:[%s6032 + $0x108] sm:$0xff]
  %v6067 = vld [vmem:[%s6032 + $0x110] sm:$0xff]
  %v6068 = vld [vmem:[%s6032 + $0x118] sm:$0xff]
  %v6069 = vld [vmem:[%s6032 + $0x120] sm:$0xff]
  %v6070 = vld [vmem:[%s6032 + $0x128] sm:$0xff]
  %v6071 = vld [vmem:[%s6032 + $0x130] sm:$0xff]
  %v6072 = vld [vmem:[%s6032 + $0x138] sm:$0xff]
  %v6073 = vld [vmem:[%s6032 + $0x140] sm:$0xff]
  %v6074 = vld [vmem:[%s6032 + $0x148] sm:$0xff]
  %v6075 = vld [vmem:[%s6032 + $0x150] sm:$0xff]
  %v6076 = vld [vmem:[%s6032 + $0x158] sm:$0xff]
  %v6077 = vld [vmem:[%s6032 + $0x160] sm:$0xff]
  %v6078 = vld [vmem:[%s6032 + $0x168] sm:$0xff]
  %v6079 = vld [vmem:[%s6032 + $0x170] sm:$0xff]
  %v6080 = vld [vmem:[%s6032 + $0x178] sm:$0xff]
  %v6081 = vld [vmem:[%s6032 + $0x180] sm:$0xff]
  %v6082 = vld [vmem:[%s6032 + $0x188] sm:$0xff]
  %v6083 = vld [vmem:[%s6032 + $0x190] sm:$0xff]
  %v6084 = vld [vmem:[%s6032 + $0x198] sm:$0xff]
  %v6085 = vld [vmem:[%s6032 + $0x1a0] sm:$0xff]
  %v6086 = vld [vmem:[%s6032 + $0x1a8] sm:$0xff]
  %v6087 = vld [vmem:[%s6032 + $0x1b0] sm:$0xff]
  %v6088 = vld [vmem:[%s6032 + $0x1b8] sm:$0xff]
  %v6089 = vld [vmem:[%s6032 + $0x1c0] sm:$0xff]
  %v6090 = vld [vmem:[%s6032 + $0x1c8] sm:$0xff]
  %v6091 = vld [vmem:[%s6032 + $0x1d0] sm:$0xff]
  %v6092 = vld [vmem:[%s6032 + $0x1d8] sm:$0xff]
  %v6093 = vld [vmem:[%s6032 + $0x1e0] sm:$0xff]
  %v6094 = vld [vmem:[%s6032 + $0x1e8] sm:$0xff]
  %v6095 = vld [vmem:[%s6032 + $0x1f0] sm:$0xff]
  %v6096 = vld [vmem:[%s6032 + $0x1f8] sm:$0xff]
  %v6097 = vld [vmem:[%s6032 + $0x200] sm:$0xff]
  %v6098 = vld [vmem:[%s6032 + $0x208] sm:$0xff]
  %v6099 = vld [vmem:[%s6032 + $0x210] sm:$0xff]
  %v6100 = vld [vmem:[%s6032 + $0x218] sm:$0xff]
  %v6101 = vld [vmem:[%s6032 + $0x220] sm:$0xff]
  %v6102 = vld [vmem:[%s6032 + $0x228] sm:$0xff]
  %v6103 = vld [vmem:[%s6032 + $0x230] sm:$0xff]
  %v6104 = vld [vmem:[%s6032 + $0x238] sm:$0xff]
  %v6105 = vld [vmem:[%s6032 + $0x240] sm:$0xff]
  %v6106 = vld [vmem:[%s6032 + $0x248] sm:$0xff]
  %v6107 = vld [vmem:[%s6032 + $0x250] sm:$0xff]
  %v6108 = vld [vmem:[%s6032 + $0x258] sm:$0xff]
  %v6109 = vld [vmem:[%s6032 + $0x260] sm:$0xff]
  %v6110 = vld [vmem:[%s6032 + $0x268] sm:$0xff]
  %v6111 = vld [vmem:[%s6032 + $0x270] sm:$0xff]
  %v6112 = vld [vmem:[%s6032 + $0x278] sm:$0xff]
  %v6113 = vld [vmem:[%s6032 + $0x280] sm:$0xff]
  %v6114 = vld [vmem:[%s6032 + $0x288] sm:$0xff]
  %v6115 = vld [vmem:[%s6032 + $0x290] sm:$0xff]
  %v6116 = vld [vmem:[%s6032 + $0x298] sm:$0xff]
  %v6117 = vld [vmem:[%s6032 + $0x2a0] sm:$0xff]
  %v6118 = vld [vmem:[%s6032 + $0x2a8] sm:$0xff]
  %v6119 = vld [vmem:[%s6032 + $0x2b0] sm:$0xff]
  %v6120 = vld [vmem:[%s6032 + $0x2b8] sm:$0xff]
  %v6121 = vld [vmem:[%s6032 + $0x2c0] sm:$0xff]
  %v6122 = vld [vmem:[%s6032 + $0x2c8] sm:$0xff]
  %v6123 = vld [vmem:[%s6032 + $0x2d0] sm:$0xff]
  %v6124 = vld [vmem:[%s6032 + $0x2d8] sm:$0xff]
  %v6125 = vld [vmem:[%s6032 + $0x2e0] sm:$0xff]
  %v6126 = vld [vmem:[%s6032 + $0x2e8] sm:$0xff]
  %v6127 = vld [vmem:[%s6032 + $0x2f0] sm:$0xff]
  %v6128 = vld [vmem:[%s6032 + $0x2f8] sm:$0xff]
  %v6129 = vld [vmem:[%s6032 + $0x300] sm:$0xff]
  %v6130 = vld [vmem:[%s6032 + $0x308] sm:$0xff]
  %v6131 = vld [vmem:[%s6032 + $0x310] sm:$0xff]
  %v6132 = vld [vmem:[%s6032 + $0x318] sm:$0xff]
  %v6133 = vld [vmem:[%s6032 + $0x320] sm:$0xff]
  %v6134 = vld [vmem:[%s6032 + $0x328] sm:$0xff]
  %v6135 = vld [vmem:[%s6032 + $0x330] sm:$0xff]
  %v6136 = vld [vmem:[%s6032 + $0x338] sm:$0xff]
  %v6137 = vld [vmem:[%s6032 + $0x340] sm:$0xff]
  %v6138 = vld [vmem:[%s6032 + $0x348] sm:$0xff]
  %v6139 = vld [vmem:[%s6032 + $0x350] sm:$0xff]
  %v6140 = vld [vmem:[%s6032 + $0x358] sm:$0xff]
  %v6141 = vld [vmem:[%s6032 + $0x360] sm:$0xff]
  %v6142 = vld [vmem:[%s6032 + $0x368] sm:$0xff]
  %v6143 = vld [vmem:[%s6032 + $0x370] sm:$0xff]
  %v6144 = vld [vmem:[%s6032 + $0x378] sm:$0xff]
  %v6145 = vld [vmem:[%s6032 + $0x380] sm:$0xff]
  %v6146 = vld [vmem:[%s6032 + $0x388] sm:$0xff]
  %v6147 = vld [vmem:[%s6032 + $0x390] sm:$0xff]
  %v6148 = vld [vmem:[%s6032 + $0x398] sm:$0xff]
  %v6149 = vld [vmem:[%s6032 + $0x3a0] sm:$0xff]
  %v6150 = vld [vmem:[%s6032 + $0x3a8] sm:$0xff]
  %v6151 = vld [vmem:[%s6032 + $0x3b0] sm:$0xff]
  %v6152 = vld [vmem:[%s6032 + $0x3b8] sm:$0xff]
  %v6153 = vld [vmem:[%s6032 + $0x3c0] sm:$0xff]
  %v6154 = vld [vmem:[%s6032 + $0x3c8] sm:$0xff]
  %v6155 = vld [vmem:[%s6032 + $0x3d0] sm:$0xff]
  %v6156 = vld [vmem:[%s6032 + $0x3d8] sm:$0xff]
  %v6157 = vld [vmem:[%s6032 + $0x3e0] sm:$0xff]
  %v6158 = vld [vmem:[%s6032 + $0x3e8] sm:$0xff]
  %v6159 = vld [vmem:[%s6032 + $0x3f0] sm:$0xff]
  %v6160 = vld [vmem:[%s6032 + $0x3f8] sm:$0xff]
  %v6161 = vld [vmem:[%s6032 + $0x400] sm:$0xff]
  %v6162 = vld [vmem:[%s6032 + $0x408] sm:$0xff]
  %v6163 = vld [vmem:[%s6032 + $0x410] sm:$0xff]
  %v6164 = vld [vmem:[%s6032 + $0x418] sm:$0xff]
  %v6165 = vld [vmem:[%s6032 + $0x420] sm:$0xff]
  %v6166 = vld [vmem:[%s6032 + $0x428] sm:$0xff]
  %v6167 = vld [vmem:[%s6032 + $0x430] sm:$0xff]
  %v6168 = vld [vmem:[%s6032 + $0x438] sm:$0xff]
  %v6169 = vld [vmem:[%s6032 + $0x440] sm:$0xff]
  %v6170 = vld [vmem:[%s6032 + $0x448] sm:$0xff]
  %v6171 = vld [vmem:[%s6032 + $0x450] sm:$0xff]
  %v6172 = vld [vmem:[%s6032 + $0x458] sm:$0xff]
  %v6173 = vld [vmem:[%s6032 + $0x460] sm:$0xff]
  %v6174 = vld [vmem:[%s6032 + $0x468] sm:$0xff]
  %v6175 = vld [vmem:[%s6032 + $0x470] sm:$0xff]
  %v6176 = vld [vmem:[%s6032 + $0x478] sm:$0xff]
  %v6177 = vld [vmem:[%s6032 + $0x480] sm:$0xff]
  %v6178 = vld [vmem:[%s6032 + $0x488] sm:$0xff]
  %v6179 = vld [vmem:[%s6032 + $0x490] sm:$0xff]
  %v6180 = vld [vmem:[%s6032 + $0x498] sm:$0xff]
  %v6181 = vld [vmem:[%s6032 + $0x4a0] sm:$0xff]
  %v6182 = vld [vmem:[%s6032 + $0x4a8] sm:$0xff]
  %v6183 = vld [vmem:[%s6032 + $0x4b0] sm:$0xff]
  %v6184 = vld [vmem:[%s6032 + $0x4b8] sm:$0xff]
  %v6185 = vld [vmem:[%s6032 + $0x4c0] sm:$0xff]
  %v6186 = vld [vmem:[%s6032 + $0x4c8] sm:$0xff]
  %v6187 = vld [vmem:[%s6032 + $0x4d0] sm:$0xff]
  %v6188 = vld [vmem:[%s6032 + $0x4d8] sm:$0xff]
  %v6189 = vld [vmem:[%s6032 + $0x4e0] sm:$0xff]
  %v6190 = vld [vmem:[%s6032 + $0x4e8] sm:$0xff]
  %v6191 = vld [vmem:[%s6032 + $0x4f0] sm:$0xff]
  %v6192 = vld [vmem:[%s6032 + $0x4f8] sm:$0xff]
  %v6193 = vld [vmem:[%s6032 + $0x500] sm:$0xff]
  %v6194 = vld [vmem:[%s6032 + $0x508] sm:$0xff]
  %v6195 = vld [vmem:[%s6032 + $0x510] sm:$0xff]
  %v6196 = vld [vmem:[%s6032 + $0x518] sm:$0xff]
  %v6197 = vld [vmem:[%s6032 + $0x520] sm:$0xff]
  %v6198 = vld [vmem:[%s6032 + $0x528] sm:$0xff]
  %v6199 = vld [vmem:[%s6032 + $0x530] sm:$0xff]
  %v6200 = vld [vmem:[%s6032 + $0x538] sm:$0xff]
  %v6201 = vld [vmem:[%s6032 + $0x540] sm:$0xff]
  %v6202 = vld [vmem:[%s6032 + $0x548] sm:$0xff]
  %v6203 = vld [vmem:[%s6032 + $0x550] sm:$0xff]
  %v6204 = vld [vmem:[%s6032 + $0x558] sm:$0xff]
  %v6205 = vld [vmem:[%s6032 + $0x560] sm:$0xff]
  %v6206 = vld [vmem:[%s6032 + $0x568] sm:$0xff]
  %v6207 = vld [vmem:[%s6032 + $0x570] sm:$0xff]
  %v6208 = vld [vmem:[%s6032 + $0x578] sm:$0xff]
  %v6209 = vld [vmem:[%s6032 + $0x580] sm:$0xff]
  %v6210 = vld [vmem:[%s6032 + $0x588] sm:$0xff]
  %v6211 = vld [vmem:[%s6032 + $0x590] sm:$0xff]
  %v6212 = vld [vmem:[%s6032 + $0x598] sm:$0xff]
  %v6213 = vld [vmem:[%s6032 + $0x5a0] sm:$0xff]
  %v6214 = vld [vmem:[%s6032 + $0x5a8] sm:$0xff]
  %v6215 = vld [vmem:[%s6032 + $0x5b0] sm:$0xff]
  %v6216 = vld [vmem:[%s6032 + $0x5b8] sm:$0xff]
  %v6217 = vld [vmem:[%s6032 + $0x5c0] sm:$0xff]
  %v6218 = vld [vmem:[%s6032 + $0x5c8] sm:$0xff]
  %v6219 = vld [vmem:[%s6032 + $0x5d0] sm:$0xff]
  %v6220 = vld [vmem:[%s6032 + $0x5d8] sm:$0xff]
  %v6221 = vld [vmem:[%s6032 + $0x5e0] sm:$0xff]
  %v6222 = vld [vmem:[%s6032 + $0x5e8] sm:$0xff]
  %v6223 = vld [vmem:[%s6032 + $0x5f0] sm:$0xff]
  %v6224 = vld [vmem:[%s6032 + $0x5f8] sm:$0xff]
  %v6225 = vld [vmem:[%s6032 + $0x600] sm:$0xff]
  %v6226 = vld [vmem:[%s6032 + $0x608] sm:$0xff]
  %v6227 = vld [vmem:[%s6032 + $0x610] sm:$0xff]
  %v6228 = vld [vmem:[%s6032 + $0x618] sm:$0xff]
  %v6229 = vld [vmem:[%s6032 + $0x620] sm:$0xff]
  %v6230 = vld [vmem:[%s6032 + $0x628] sm:$0xff]
  %v6231 = vld [vmem:[%s6032 + $0x630] sm:$0xff]
  %v6232 = vld [vmem:[%s6032 + $0x638] sm:$0xff]
  %v6233 = vld [vmem:[%s6032 + $0x640] sm:$0xff]
  %v6234 = vld [vmem:[%s6032 + $0x648] sm:$0xff]
  %v6235 = vld [vmem:[%s6032 + $0x650] sm:$0xff]
  %v6236 = vld [vmem:[%s6032 + $0x658] sm:$0xff]
  %v6237 = vld [vmem:[%s6032 + $0x660] sm:$0xff]
  %v6238 = vld [vmem:[%s6032 + $0x668] sm:$0xff]
  %v6239 = vld [vmem:[%s6032 + $0x670] sm:$0xff]
  %v6240 = vld [vmem:[%s6032 + $0x678] sm:$0xff]
  %v6241 = vld [vmem:[%s6032 + $0x680] sm:$0xff]
  %v6242 = vld [vmem:[%s6032 + $0x688] sm:$0xff]
  %v6243 = vld [vmem:[%s6032 + $0x690] sm:$0xff]
  %v6244 = vld [vmem:[%s6032 + $0x698] sm:$0xff]
  %v6245 = vld [vmem:[%s6032 + $0x6a0] sm:$0xff]
  %v6246 = vld [vmem:[%s6032 + $0x6a8] sm:$0xff]
  %v6247 = vld [vmem:[%s6032 + $0x6b0] sm:$0xff]
  %v6248 = vld [vmem:[%s6032 + $0x6b8] sm:$0xff]
  %v6249 = vld [vmem:[%s6032 + $0x6c0] sm:$0xff]
  %v6250 = vld [vmem:[%s6032 + $0x6c8] sm:$0xff]
  %v6251 = vld [vmem:[%s6032 + $0x6d0] sm:$0xff]
  %v6252 = vld [vmem:[%s6032 + $0x6d8] sm:$0xff]
  %v6253 = vld [vmem:[%s6032 + $0x6e0] sm:$0xff]
  %v6254 = vld [vmem:[%s6032 + $0x6e8] sm:$0xff]
  %v6255 = vld [vmem:[%s6032 + $0x6f0] sm:$0xff]
  %v6256 = vld [vmem:[%s6032 + $0x6f8] sm:$0xff]
  %v6257 = vld [vmem:[%s6032 + $0x700] sm:$0xff]
  %v6258 = vld [vmem:[%s6032 + $0x708] sm:$0xff]
  %v6259 = vld [vmem:[%s6032 + $0x710] sm:$0xff]
  %v6260 = vld [vmem:[%s6032 + $0x718] sm:$0xff]
  %v6261 = vld [vmem:[%s6032 + $0x720] sm:$0xff]
  %v6262 = vld [vmem:[%s6032 + $0x728] sm:$0xff]
  %v6263 = vld [vmem:[%s6032 + $0x730] sm:$0xff]
  %v6264 = vld [vmem:[%s6032 + $0x738] sm:$0xff]
  %v6265 = vld [vmem:[%s6032 + $0x740] sm:$0xff]
  %v6266 = vld [vmem:[%s6032 + $0x748] sm:$0xff]
  %v6267 = vld [vmem:[%s6032 + $0x750] sm:$0xff]
  %v6268 = vld [vmem:[%s6032 + $0x758] sm:$0xff]
  %v6269 = vld [vmem:[%s6032 + $0x760] sm:$0xff]
  %v6270 = vld [vmem:[%s6032 + $0x768] sm:$0xff]
  %v6271 = vld [vmem:[%s6032 + $0x770] sm:$0xff]
  %v6272 = vld [vmem:[%s6032 + $0x778] sm:$0xff]
  %v6273 = vld [vmem:[%s6032 + $0x780] sm:$0xff]
  %v6274 = vld [vmem:[%s6032 + $0x788] sm:$0xff]
  %v6275 = vld [vmem:[%s6032 + $0x790] sm:$0xff]
  %v6276 = vld [vmem:[%s6032 + $0x798] sm:$0xff]
  %v6277 = vld [vmem:[%s6032 + $0x7a0] sm:$0xff]
  %v6278 = vld [vmem:[%s6032 + $0x7a8] sm:$0xff]
  %v6279 = vld [vmem:[%s6032 + $0x7b0] sm:$0xff]
  %v6280 = vld [vmem:[%s6032 + $0x7b8] sm:$0xff]
  %v6281 = vld [vmem:[%s6032 + $0x7c0] sm:$0xff]
  %v6282 = vld [vmem:[%s6032 + $0x7c8] sm:$0xff]
  %v6283 = vld [vmem:[%s6032 + $0x7d0] sm:$0xff]
  %v6284 = vld [vmem:[%s6032 + $0x7d8] sm:$0xff]
  %v6285 = vld [vmem:[%s6032 + $0x7e0] sm:$0xff]
  %v6286 = vld [vmem:[%s6032 + $0x7e8] sm:$0xff]
  %v6287 = vld [vmem:[%s6032 + $0x7f0] sm:$0xff]
  %v6288 = vld [vmem:[%s6032 + $0x7f8] sm:$0xff]
  %v6289 = vld [vmem:[%s6032 + $0x800] sm:$0xff]
  %v6290 = vld [vmem:[%s6032 + $0x808] sm:$0xff]
  %v6291 = vld [vmem:[%s6032 + $0x810] sm:$0xff]
  %v6292 = vld [vmem:[%s6032 + $0x818] sm:$0xff]
  %v6293 = vld [vmem:[%s6032 + $0x820] sm:$0xff]
  %v6294 = vld [vmem:[%s6032 + $0x828] sm:$0xff]
  %v6295 = vld [vmem:[%s6032 + $0x830] sm:$0xff]
  %v6296 = vld [vmem:[%s6032 + $0x838] sm:$0xff]
  %v6297 = vld [vmem:[%s6032 + $0x840] sm:$0xff]
  %v6298 = vld [vmem:[%s6032 + $0x848] sm:$0xff]
  %v6299 = vld [vmem:[%s6032 + $0x850] sm:$0xff]
  %v6300 = vld [vmem:[%s6032 + $0x858] sm:$0xff]
  %v6301 = vld [vmem:[%s6032 + $0x860] sm:$0xff]
  %v6302 = vld [vmem:[%s6032 + $0x868] sm:$0xff]
  %v6303 = vld [vmem:[%s6032 + $0x870] sm:$0xff]
  %v6304 = vld [vmem:[%s6032 + $0x878] sm:$0xff]
  %v6305 = vld [vmem:[%s6032 + $0x880] sm:$0xff]
  %v6306 = vld [vmem:[%s6032 + $0x888] sm:$0xff]
  %v6307 = vld [vmem:[%s6032 + $0x890] sm:$0xff]
  %v6308 = vld [vmem:[%s6032 + $0x898] sm:$0xff]
  %v6309 = vld [vmem:[%s6032 + $0x8a0] sm:$0xff]
  %v6310 = vld [vmem:[%s6032 + $0x8a8] sm:$0xff]
  %v6311 = vld [vmem:[%s6032 + $0x8b0] sm:$0xff]
  %v6312 = vld [vmem:[%s6032 + $0x8b8] sm:$0xff]
  %v6313 = vld [vmem:[%s6032 + $0x8c0] sm:$0xff]
  %v6314 = vld [vmem:[%s6032 + $0x8c8] sm:$0xff]
  %v6315 = vld [vmem:[%s6032 + $0x8d0] sm:$0xff]
  %v6316 = vld [vmem:[%s6032 + $0x8d8] sm:$0xff]
  %v6317 = vld [vmem:[%s6032 + $0x8e0] sm:$0xff]
  %v6318 = vld [vmem:[%s6032 + $0x8e8] sm:$0xff]
  %v6319 = vld [vmem:[%s6032 + $0x8f0] sm:$0xff]
  %v6320 = vld [vmem:[%s6032 + $0x8f8] sm:$0xff]
  %v6321 = vld [vmem:[%s6032 + $0x900] sm:$0xff]
  %v6322 = vld [vmem:[%s6032 + $0x908] sm:$0xff]
  %v6323 = vld [vmem:[%s6032 + $0x910] sm:$0xff]
  %v6324 = vld [vmem:[%s6032 + $0x918] sm:$0xff]
  %v6325 = vld [vmem:[%s6032 + $0x920] sm:$0xff]
  %v6326 = vld [vmem:[%s6032 + $0x928] sm:$0xff]
  %v6327 = vld [vmem:[%s6032 + $0x930] sm:$0xff]
  %v6328 = vld [vmem:[%s6032 + $0x938] sm:$0xff]
  %v6329 = vld [vmem:[%s6032 + $0x940] sm:$0xff]
  %v6330 = vld [vmem:[%s6032 + $0x948] sm:$0xff]
  %v6331 = vld [vmem:[%s6032 + $0x950] sm:$0xff]
  %v6332 = vld [vmem:[%s6032 + $0x958] sm:$0xff]
  %v6333 = vld [vmem:[%s6032 + $0x960] sm:$0xff]
  %v6334 = vld [vmem:[%s6032 + $0x968] sm:$0xff]
  %v6335 = vld [vmem:[%s6032 + $0x970] sm:$0xff]
  %v6336 = vld [vmem:[%s6032 + $0x978] sm:$0xff]
  %v6337 = vld [vmem:[%s6032 + $0x980] sm:$0xff]
  %v6338 = vld [vmem:[%s6032 + $0x988] sm:$0xff]
  %v6339 = vld [vmem:[%s6032 + $0x990] sm:$0xff]
  %v6340 = vld [vmem:[%s6032 + $0x998] sm:$0xff]
  %v6341 = vld [vmem:[%s6032 + $0x9a0] sm:$0xff]
  %v6342 = vld [vmem:[%s6032 + $0x9a8] sm:$0xff]
  %v6343 = vld [vmem:[%s6032 + $0x9b0] sm:$0xff]
  %v6344 = vld [vmem:[%s6032 + $0x9b8] sm:$0xff]
  %v6345 = vld [vmem:[%s6032 + $0x9c0] sm:$0xf]
  %v6346 = vld [vmem:[%s6032 + $0x9c8] sm:$0xf]
  %v6347 = vld [vmem:[%s6032 + $0x9d0] sm:$0xf]
  %v6348 = vld [vmem:[%s6032 + $0x9d8] sm:$0xf]
  %v6349 = vld [vmem:[%s6032 + $0x9e0] sm:$0xf]
  %v6350 = vld [vmem:[%s6032 + $0x9e8] sm:$0xf]
  %v6351 = vld [vmem:[%s6032 + $0x9f0] sm:$0xf]
  %v6352 = vld [vmem:[%s6032 + $0x9f8] sm:$0xf]
  %v6353 = vld [vmem:[%s6032 + $0xa00] sm:$0xf]
  %v6354 = vld [vmem:[%s6032 + $0xa08] sm:$0xf]
  %v6355 = vld [vmem:[%s6032 + $0xa10] sm:$0xf]
  %v6356 = vld [vmem:[%s6032 + $0xa18] sm:$0xf]
  %v6357 = vld [vmem:[%s6032 + $0xa20] sm:$0xf]
  %vm6358 = vcmask 556032
  %v6360 = vsel %vm6358, %v6031, 0
  %v6363 = vsel %vm5651, %v6345, 0
  %v6366 = vsel %vm5651, %v6346, 0
  %v6369 = vsel %vm5651, %v6347, 0
  %v6372 = vsel %vm5651, %v6348, 0
  %v6375 = vsel %vm5651, %v6349, 0
  %v6378 = vsel %vm5651, %v6350, 0
  %v6381 = vsel %vm5651, %v6351, 0
  %v6384 = vsel %vm5651, %v6352, 0
  %v6387 = vsel %vm5651, %v6353, 0
  %v6390 = vsel %vm5651, %v6354, 0
  %v6393 = vsel %vm5651, %v6355, 0
  %v6396 = vsel %vm5651, %v6356, 0
  %v6399 = vsel %vm5651, %v6357, 0
  %6401 = vmatprep.subr.mxu0 %v6229
  %6402 = vmatpush1.msra.mxu0 %v6228
  %6403 = vmatprep.subr.mxu0 %v6216
  %6404 = vmatpush1.msra.mxu0 %v6215
  %6405 = vmatprep.subr.mxu0 %v6203
  %6406 = vmatpush1.msra.mxu0 %v6202
  %6407 = vmatprep.subr.mxu0 %v6190
  %6408 = vmatpush1.msra.mxu0 %v6189
  %6409 = vmatprep.subr.mxu0 %v6177
  %6410 = vmatpush1.msra.mxu0 %v6176
  %6411 = vmatprep.subr.mxu0 %v6164
  %6412 = vmatpush1.msra.mxu0 %v6163
  %6413 = vmatprep.subr.mxu0 %v6151
  %6414 = vmatpush1.msra.mxu0 %v6150
  %6415 = vmatprep.subr.mxu0 %v6138
  %6416 = vmatpush1.msra.mxu0 %v6137
  %6417 = vmatprep.subr.mxu0 %v6125
  %6418 = vmatpush1.msra.mxu0 %v6124
  %6419 = vmatprep.subr.mxu0 %v6112
  %6420 = vmatpush1.msra.mxu0 %v6111
  %6421 = vmatprep.subr.mxu0 %v6099
  %6422 = vmatpush1.msra.mxu0 %v6098
  %6423 = vmatprep.subr.mxu0 %v6086
  %6424 = vmatpush1.msra.mxu0 %v6085
  %6425 = vmatprep.subr.mxu0 %v6073
  %6426 = vmatpush1.msra.mxu0 %v6072
  %6427 = vmatprep.subr.mxu0 %v6060
  %6428 = vmatpush1.msra.mxu0 %v6059
  %6429 = vmatprep.subr.mxu0 %v6047
  %6430 = vmatpush1.msra.mxu0 %v6046
  %6431 = vmatprep.subr.mxu0 %v6034
  %6432 = vmatpush1.msra.mxu0 %v6033
  %6433 = vmatprep.subr.mxu0 0.0
  %6434 = vmatpush2.msra.mxu0 0.0
  %6435 = vmatprep.subr.mxu0 0.0
  %6436 = vmatpush2.msra.mxu0 0.0
  %6437 = vmatprep.subr.mxu0 0.0
  %6438 = vmatpush2.msra.mxu0 0.0
  %6439 = vmatprep.subr.mxu0 0.0
  %6440 = vmatpush2.msra.mxu0 0.0
  %6441 = vmatprep.subr.mxu0 0.0
  %6442 = vmatpush2.msra.mxu0 0.0
  %6443 = vmatprep.subr.mxu0 0.0
  %6444 = vmatpush2.msra.mxu0 0.0
  %6445 = vmatprep.subr.mxu0 0.0
  %6446 = vmatpush2.msra.mxu0 0.0
  %6447 = vmatprep.subr.mxu0 %v6366
  %6448 = vmatpush2.msra.mxu0 %v6363
  %6449 = vmatprep.subr.mxu0 %v6333
  %6450 = vmatpush2.msra.mxu0 %v6332
  %6451 = vmatprep.subr.mxu0 %v6320
  %6452 = vmatpush2.msra.mxu0 %v6319
  %6453 = vmatprep.subr.mxu0 %v6307
  %6454 = vmatpush2.msra.mxu0 %v6306
  %6455 = vmatprep.subr.mxu0 %v6294
  %6456 = vmatpush2.msra.mxu0 %v6293
  %6457 = vmatprep.subr.mxu0 %v6281
  %6458 = vmatpush2.msra.mxu0 %v6280
  %6459 = vmatprep.subr.mxu0 %v6268
  %6460 = vmatpush2.msra.mxu0 %v6267
  %6461 = vmatprep.subr.mxu0 %v6255
  %6462 = vmatpush2.msra.mxu0 %v6254
  %6463 = vmatprep.subr.mxu0 %v6242
  %6464 = vmatpush2.msra.mxu0 %v6241
  %6465 = vmatprep.mubr.f32.mxu0 %v6360
  %6466 = vmatmul.mubr.f32.gmra.mxu0 %v6030
  %v6467 = vpop.f32.mrf.mxu0
  %v6468 = vadd.f32 0.0, %v6467
  %v6469 = vpop.f32.mrf.mxu0
  %v6470 = vadd.f32 0.0, %v6469
  %6471 = vdwg.mxu0
  %6472 = vmatprep.subr.mxu0 %v6231
  %6473 = vmatpush1.msra.mxu0 %v6230
  %6474 = vmatprep.subr.mxu0 %v6218
  %6475 = vmatpush1.msra.mxu0 %v6217
  %6476 = vmatprep.subr.mxu0 %v6205
  %6477 = vmatpush1.msra.mxu0 %v6204
  %6478 = vmatprep.subr.mxu0 %v6192
  %6479 = vmatpush1.msra.mxu0 %v6191
  %6480 = vmatprep.subr.mxu0 %v6179
  %6481 = vmatpush1.msra.mxu0 %v6178
  %6482 = vmatprep.subr.mxu0 %v6166
  %6483 = vmatpush1.msra.mxu0 %v6165
  %6484 = vmatprep.subr.mxu0 %v6153
  %6485 = vmatpush1.msra.mxu0 %v6152
  %6486 = vmatprep.subr.mxu0 %v6140
  %6487 = vmatpush1.msra.mxu0 %v6139
  %6488 = vmatprep.subr.mxu0 %v6127
  %6489 = vmatpush1.msra.mxu0 %v6126
  %6490 = vmatprep.subr.mxu0 %v6114
  %6491 = vmatpush1.msra.mxu0 %v6113
  %6492 = vmatprep.subr.mxu0 %v6101
  %6493 = vmatpush1.msra.mxu0 %v6100
  %6494 = vmatprep.subr.mxu0 %v6088
  %6495 = vmatpush1.msra.mxu0 %v6087
  %6496 = vmatprep.subr.mxu0 %v6075
  %6497 = vmatpush1.msra.mxu0 %v6074
  %6498 = vmatprep.subr.mxu0 %v6062
  %6499 = vmatpush1.msra.mxu0 %v6061
  %6500 = vmatprep.subr.mxu0 %v6049
  %6501 = vmatpush1.msra.mxu0 %v6048
  %6502 = vmatprep.subr.mxu0 %v6036
  %6503 = vmatpush1.msra.mxu0 %v6035
  %6504 = vmatprep.subr.mxu0 0.0
  %6505 = vmatpush2.msra.mxu0 0.0
  %6506 = vmatprep.subr.mxu0 0.0
  %6507 = vmatpush2.msra.mxu0 0.0
  %6508 = vmatprep.subr.mxu0 0.0
  %6509 = vmatpush2.msra.mxu0 0.0
  %6510 = vmatprep.subr.mxu0 0.0
  %6511 = vmatpush2.msra.mxu0 0.0
  %6512 = vmatprep.subr.mxu0 0.0
  %6513 = vmatpush2.msra.mxu0 0.0
  %6514 = vmatprep.subr.mxu0 0.0
  %6515 = vmatpush2.msra.mxu0 0.0
  %6516 = vmatprep.subr.mxu0 0.0
  %6517 = vmatpush2.msra.mxu0 0.0
  %6518 = vmatprep.subr.mxu0 %v6372
  %6519 = vmatpush2.msra.mxu0 %v6369
  %6520 = vmatprep.subr.mxu0 %v6335
  %6521 = vmatpush2.msra.mxu0 %v6334
  %6522 = vmatprep.subr.mxu0 %v6322
  %6523 = vmatpush2.msra.mxu0 %v6321
  %6524 = vmatprep.subr.mxu0 %v6309
  %6525 = vmatpush2.msra.mxu0 %v6308
  %6526 = vmatprep.subr.mxu0 %v6296
  %6527 = vmatpush2.msra.mxu0 %v6295
  %6528 = vmatprep.subr.mxu0 %v6283
  %6529 = vmatpush2.msra.mxu0 %v6282
  %6530 = vmatprep.subr.mxu0 %v6270
  %6531 = vmatpush2.msra.mxu0 %v6269
  %6532 = vmatprep.subr.mxu0 %v6257
  %6533 = vmatpush2.msra.mxu0 %v6256
  %6534 = vmatprep.subr.mxu0 %v6244
  %6535 = vmatpush2.msra.mxu0 %v6243
  %6536 = vmatprep.mubr.f32.mxu0 %v6360
  %6537 = vmatmul.mubr.f32.gmra.mxu0 %v6030
  %v6538 = vpop.f32.mrf.mxu0
  %v6539 = vadd.f32 0.0, %v6538
  %v6540 = vpop.f32.mrf.mxu0
  %v6541 = vadd.f32 0.0, %v6540
  %6542 = vdwg.mxu0
  %6543 = vmatprep.subr.mxu0 %v6233
  %6544 = vmatpush1.msra.mxu0 %v6232
  %6545 = vmatprep.subr.mxu0 %v6220
  %6546 = vmatpush1.msra.mxu0 %v6219
  %6547 = vmatprep.subr.mxu0 %v6207
  %6548 = vmatpush1.msra.mxu0 %v6206
  %6549 = vmatprep.subr.mxu0 %v6194
  %6550 = vmatpush1.msra.mxu0 %v6193
  %6551 = vmatprep.subr.mxu0 %v6181
  %6552 = vmatpush1.msra.mxu0 %v6180
  %6553 = vmatprep.subr.mxu0 %v6168
  %6554 = vmatpush1.msra.mxu0 %v6167
  %6555 = vmatprep.subr.mxu0 %v6155
  %6556 = vmatpush1.msra.mxu0 %v6154
  %6557 = vmatprep.subr.mxu0 %v6142
  %6558 = vmatpush1.msra.mxu0 %v6141
  %6559 = vmatprep.subr.mxu0 %v6129
  %6560 = vmatpush1.msra.mxu0 %v6128
  %6561 = vmatprep.subr.mxu0 %v6116
  %6562 = vmatpush1.msra.mxu0 %v6115
  %6563 = vmatprep.subr.mxu0 %v6103
  %6564 = vmatpush1.msra.mxu0 %v6102
  %6565 = vmatprep.subr.mxu0 %v6090
  %6566 = vmatpush1.msra.mxu0 %v6089
  %6567 = vmatprep.subr.mxu0 %v6077
  %6568 = vmatpush1.msra.mxu0 %v6076
  %6569 = vmatprep.subr.mxu0 %v6064
  %6570 = vmatpush1.msra.mxu0 %v6063
  %6571 = vmatprep.subr.mxu0 %v6051
  %6572 = vmatpush1.msra.mxu0 %v6050
  %6573 = vmatprep.subr.mxu0 %v6038
  %6574 = vmatpush1.msra.mxu0 %v6037
  %6575 = vmatprep.subr.mxu0 0.0
  %6576 = vmatpush2.msra.mxu0 0.0
  %6577 = vmatprep.subr.mxu0 0.0
  %6578 = vmatpush2.msra.mxu0 0.0
  %6579 = vmatprep.subr.mxu0 0.0
  %6580 = vmatpush2.msra.mxu0 0.0
  %6581 = vmatprep.subr.mxu0 0.0
  %6582 = vmatpush2.msra.mxu0 0.0
  %6583 = vmatprep.subr.mxu0 0.0
  %6584 = vmatpush2.msra.mxu0 0.0
  %6585 = vmatprep.subr.mxu0 0.0
  %6586 = vmatpush2.msra.mxu0 0.0
  %6587 = vmatprep.subr.mxu0 0.0
  %6588 = vmatpush2.msra.mxu0 0.0
  %6589 = vmatprep.subr.mxu0 %v6378
  %6590 = vmatpush2.msra.mxu0 %v6375
  %6591 = vmatprep.subr.mxu0 %v6337
  %6592 = vmatpush2.msra.mxu0 %v6336
  %6593 = vmatprep.subr.mxu0 %v6324
  %6594 = vmatpush2.msra.mxu0 %v6323
  %6595 = vmatprep.subr.mxu0 %v6311
  %6596 = vmatpush2.msra.mxu0 %v6310
  %6597 = vmatprep.subr.mxu0 %v6298
  %6598 = vmatpush2.msra.mxu0 %v6297
  %6599 = vmatprep.subr.mxu0 %v6285
  %6600 = vmatpush2.msra.mxu0 %v6284
  %6601 = vmatprep.subr.mxu0 %v6272
  %6602 = vmatpush2.msra.mxu0 %v6271
  %6603 = vmatprep.subr.mxu0 %v6259
  %6604 = vmatpush2.msra.mxu0 %v6258
  %6605 = vmatprep.subr.mxu0 %v6246
  %6606 = vmatpush2.msra.mxu0 %v6245
  %6607 = vmatprep.mubr.f32.mxu0 %v6360
  %6608 = vmatmul.mubr.f32.gmra.mxu0 %v6030
  %v6609 = vpop.f32.mrf.mxu0
  %v6610 = vadd.f32 0.0, %v6609
  %v6611 = vpop.f32.mrf.mxu0
  %v6612 = vadd.f32 0.0, %v6611
  %6613 = vdwg.mxu0
  %6614 = vmatprep.subr.mxu0 %v6235
  %6615 = vmatpush1.msra.mxu0 %v6234
  %6616 = vmatprep.subr.mxu0 %v6222
  %6617 = vmatpush1.msra.mxu0 %v6221
  %6618 = vmatprep.subr.mxu0 %v6209
  %6619 = vmatpush1.msra.mxu0 %v6208
  %6620 = vmatprep.subr.mxu0 %v6196
  %6621 = vmatpush1.msra.mxu0 %v6195
  %6622 = vmatprep.subr.mxu0 %v6183
  %6623 = vmatpush1.msra.mxu0 %v6182
  %6624 = vmatprep.subr.mxu0 %v6170
  %6625 = vmatpush1.msra.mxu0 %v6169
  %6626 = vmatprep.subr.mxu0 %v6157
  %6627 = vmatpush1.msra.mxu0 %v6156
  %6628 = vmatprep.subr.mxu0 %v6144
  %6629 = vmatpush1.msra.mxu0 %v6143
  %6630 = vmatprep.subr.mxu0 %v6131
  %6631 = vmatpush1.msra.mxu0 %v6130
  %6632 = vmatprep.subr.mxu0 %v6118
  %6633 = vmatpush1.msra.mxu0 %v6117
  %6634 = vmatprep.subr.mxu0 %v6105
  %6635 = vmatpush1.msra.mxu0 %v6104
  %6636 = vmatprep.subr.mxu0 %v6092
  %6637 = vmatpush1.msra.mxu0 %v6091
  %6638 = vmatprep.subr.mxu0 %v6079
  %6639 = vmatpush1.msra.mxu0 %v6078
  %6640 = vmatprep.subr.mxu0 %v6066
  %6641 = vmatpush1.msra.mxu0 %v6065
  %6642 = vmatprep.subr.mxu0 %v6053
  %6643 = vmatpush1.msra.mxu0 %v6052
  %6644 = vmatprep.subr.mxu0 %v6040
  %6645 = vmatpush1.msra.mxu0 %v6039
  %6646 = vmatprep.subr.mxu0 0.0
  %6647 = vmatpush2.msra.mxu0 0.0
  %6648 = vmatprep.subr.mxu0 0.0
  %6649 = vmatpush2.msra.mxu0 0.0
  %6650 = vmatprep.subr.mxu0 0.0
  %6651 = vmatpush2.msra.mxu0 0.0
  %6652 = vmatprep.subr.mxu0 0.0
  %6653 = vmatpush2.msra.mxu0 0.0
  %6654 = vmatprep.subr.mxu0 0.0
  %6655 = vmatpush2.msra.mxu0 0.0
  %6656 = vmatprep.subr.mxu0 0.0
  %6657 = vmatpush2.msra.mxu0 0.0
  %6658 = vmatprep.subr.mxu0 0.0
  %6659 = vmatpush2.msra.mxu0 0.0
  %6660 = vmatprep.subr.mxu0 %v6384
  %6661 = vmatpush2.msra.mxu0 %v6381
  %6662 = vmatprep.subr.mxu0 %v6339
  %6663 = vmatpush2.msra.mxu0 %v6338
  %6664 = vmatprep.subr.mxu0 %v6326
  %6665 = vmatpush2.msra.mxu0 %v6325
  %6666 = vmatprep.subr.mxu0 %v6313
  %6667 = vmatpush2.msra.mxu0 %v6312
  %6668 = vmatprep.subr.mxu0 %v6300
  %6669 = vmatpush2.msra.mxu0 %v6299
  %6670 = vmatprep.subr.mxu0 %v6287
  %6671 = vmatpush2.msra.mxu0 %v6286
  %6672 = vmatprep.subr.mxu0 %v6274
  %6673 = vmatpush2.msra.mxu0 %v6273
  %6674 = vmatprep.subr.mxu0 %v6261
  %6675 = vmatpush2.msra.mxu0 %v6260
  %6676 = vmatprep.subr.mxu0 %v6248
  %6677 = vmatpush2.msra.mxu0 %v6247
  %6678 = vmatprep.mubr.f32.mxu0 %v6360
  %6679 = vmatmul.mubr.f32.gmra.mxu0 %v6030
  %v6680 = vpop.f32.mrf.mxu0
  %v6681 = vadd.f32 0.0, %v6680
  %v6682 = vpop.f32.mrf.mxu0
  %v6683 = vadd.f32 0.0, %v6682
  %6684 = vdwg.mxu0
  %6685 = vmatprep.subr.mxu0 %v6237
  %6686 = vmatpush1.msra.mxu0 %v6236
  %6687 = vmatprep.subr.mxu0 %v6224
  %6688 = vmatpush1.msra.mxu0 %v6223
  %6689 = vmatprep.subr.mxu0 %v6211
  %6690 = vmatpush1.msra.mxu0 %v6210
  %6691 = vmatprep.subr.mxu0 %v6198
  %6692 = vmatpush1.msra.mxu0 %v6197
  %6693 = vmatprep.subr.mxu0 %v6185
  %6694 = vmatpush1.msra.mxu0 %v6184
  %6695 = vmatprep.subr.mxu0 %v6172
  %6696 = vmatpush1.msra.mxu0 %v6171
  %6697 = vmatprep.subr.mxu0 %v6159
  %6698 = vmatpush1.msra.mxu0 %v6158
  %6699 = vmatprep.subr.mxu0 %v6146
  %6700 = vmatpush1.msra.mxu0 %v6145
  %6701 = vmatprep.subr.mxu0 %v6133
  %6702 = vmatpush1.msra.mxu0 %v6132
  %6703 = vmatprep.subr.mxu0 %v6120
  %6704 = vmatpush1.msra.mxu0 %v6119
  %6705 = vmatprep.subr.mxu0 %v6107
  %6706 = vmatpush1.msra.mxu0 %v6106
  %6707 = vmatprep.subr.mxu0 %v6094
  %6708 = vmatpush1.msra.mxu0 %v6093
  %6709 = vmatprep.subr.mxu0 %v6081
  %6710 = vmatpush1.msra.mxu0 %v6080
  %6711 = vmatprep.subr.mxu0 %v6068
  %6712 = vmatpush1.msra.mxu0 %v6067
  %6713 = vmatprep.subr.mxu0 %v6055
  %6714 = vmatpush1.msra.mxu0 %v6054
  %6715 = vmatprep.subr.mxu0 %v6042
  %6716 = vmatpush1.msra.mxu0 %v6041
  %6717 = vmatprep.subr.mxu0 0.0
  %6718 = vmatpush2.msra.mxu0 0.0
  %6719 = vmatprep.subr.mxu0 0.0
  %6720 = vmatpush2.msra.mxu0 0.0
  %6721 = vmatprep.subr.mxu0 0.0
  %6722 = vmatpush2.msra.mxu0 0.0
  %6723 = vmatprep.subr.mxu0 0.0
  %6724 = vmatpush2.msra.mxu0 0.0
  %6725 = vmatprep.subr.mxu0 0.0
  %6726 = vmatpush2.msra.mxu0 0.0
  %6727 = vmatprep.subr.mxu0 0.0
  %6728 = vmatpush2.msra.mxu0 0.0
  %6729 = vmatprep.subr.mxu0 0.0
  %6730 = vmatpush2.msra.mxu0 0.0
  %6731 = vmatprep.subr.mxu0 %v6390
  %6732 = vmatpush2.msra.mxu0 %v6387
  %6733 = vmatprep.subr.mxu0 %v6341
  %6734 = vmatpush2.msra.mxu0 %v6340
  %6735 = vmatprep.subr.mxu0 %v6328
  %6736 = vmatpush2.msra.mxu0 %v6327
  %6737 = vmatprep.subr.mxu0 %v6315
  %6738 = vmatpush2.msra.mxu0 %v6314
  %6739 = vmatprep.subr.mxu0 %v6302
  %6740 = vmatpush2.msra.mxu0 %v6301
  %6741 = vmatprep.subr.mxu0 %v6289
  %6742 = vmatpush2.msra.mxu0 %v6288
  %6743 = vmatprep.subr.mxu0 %v6276
  %6744 = vmatpush2.msra.mxu0 %v6275
  %6745 = vmatprep.subr.mxu0 %v6263
  %6746 = vmatpush2.msra.mxu0 %v6262
  %6747 = vmatprep.subr.mxu0 %v6250
  %6748 = vmatpush2.msra.mxu0 %v6249
  %6749 = vmatprep.mubr.f32.mxu0 %v6360
  %6750 = vmatmul.mubr.f32.gmra.mxu0 %v6030
  %v6751 = vpop.f32.mrf.mxu0
  %v6752 = vadd.f32 0.0, %v6751
  %v6753 = vpop.f32.mrf.mxu0
  %v6754 = vadd.f32 0.0, %v6753
  %6755 = vdwg.mxu0
  %6756 = vmatprep.subr.mxu0 %v6239
  %6757 = vmatpush1.msra.mxu0 %v6238
  %6758 = vmatprep.subr.mxu0 %v6226
  %6759 = vmatpush1.msra.mxu0 %v6225
  %6760 = vmatprep.subr.mxu0 %v6213
  %6761 = vmatpush1.msra.mxu0 %v6212
  %6762 = vmatprep.subr.mxu0 %v6200
  %6763 = vmatpush1.msra.mxu0 %v6199
  %6764 = vmatprep.subr.mxu0 %v6187
  %6765 = vmatpush1.msra.mxu0 %v6186
  %6766 = vmatprep.subr.mxu0 %v6174
  %6767 = vmatpush1.msra.mxu0 %v6173
  %6768 = vmatprep.subr.mxu0 %v6161
  %6769 = vmatpush1.msra.mxu0 %v6160
  %6770 = vmatprep.subr.mxu0 %v6148
  %6771 = vmatpush1.msra.mxu0 %v6147
  %6772 = vmatprep.subr.mxu0 %v6135
  %6773 = vmatpush1.msra.mxu0 %v6134
  %6774 = vmatprep.subr.mxu0 %v6122
  %6775 = vmatpush1.msra.mxu0 %v6121
  %6776 = vmatprep.subr.mxu0 %v6109
  %6777 = vmatpush1.msra.mxu0 %v6108
  %6778 = vmatprep.subr.mxu0 %v6096
  %6779 = vmatpush1.msra.mxu0 %v6095
  %6780 = vmatprep.subr.mxu0 %v6083
  %6781 = vmatpush1.msra.mxu0 %v6082
  %6782 = vmatprep.subr.mxu0 %v6070
  %6783 = vmatpush1.msra.mxu0 %v6069
  %6784 = vmatprep.subr.mxu0 %v6057
  %6785 = vmatpush1.msra.mxu0 %v6056
  %6786 = vmatprep.subr.mxu0 %v6044
  %6787 = vmatpush1.msra.mxu0 %v6043
  %6788 = vmatprep.subr.mxu0 0.0
  %6789 = vmatpush2.msra.mxu0 0.0
  %6790 = vmatprep.subr.mxu0 0.0
  %6791 = vmatpush2.msra.mxu0 0.0
  %6792 = vmatprep.subr.mxu0 0.0
  %6793 = vmatpush2.msra.mxu0 0.0
  %6794 = vmatprep.subr.mxu0 0.0
  %6795 = vmatpush2.msra.mxu0 0.0
  %6796 = vmatprep.subr.mxu0 0.0
  %6797 = vmatpush2.msra.mxu0 0.0
  %6798 = vmatprep.subr.mxu0 0.0
  %6799 = vmatpush2.msra.mxu0 0.0
  %6800 = vmatprep.subr.mxu0 0.0
  %6801 = vmatpush2.msra.mxu0 0.0
  %6802 = vmatprep.subr.mxu0 %v6396
  %6803 = vmatpush2.msra.mxu0 %v6393
  %6804 = vmatprep.subr.mxu0 %v6343
  %6805 = vmatpush2.msra.mxu0 %v6342
  %6806 = vmatprep.subr.mxu0 %v6330
  %6807 = vmatpush2.msra.mxu0 %v6329
  %6808 = vmatprep.subr.mxu0 %v6317
  %6809 = vmatpush2.msra.mxu0 %v6316
  %6810 = vmatprep.subr.mxu0 %v6304
  %6811 = vmatpush2.msra.mxu0 %v6303
  %6812 = vmatprep.subr.mxu0 %v6291
  %6813 = vmatpush2.msra.mxu0 %v6290
  %6814 = vmatprep.subr.mxu0 %v6278
  %6815 = vmatpush2.msra.mxu0 %v6277
  %6816 = vmatprep.subr.mxu0 %v6265
  %6817 = vmatpush2.msra.mxu0 %v6264
  %6818 = vmatprep.subr.mxu0 %v6252
  %6819 = vmatpush2.msra.mxu0 %v6251
  %6820 = vmatprep.mubr.f32.mxu0 %v6360
  %6821 = vmatmul.mubr.f32.gmra.mxu0 %v6030
  %v6822 = vpop.f32.mrf.mxu0
  %v6823 = vadd.f32 0.0, %v6822
  %v6824 = vpop.f32.mrf.mxu0
  %v6825 = vadd.f32 0.0, %v6824
  %6826 = vdwg.mxu0
  %6827 = vmatprep.subr.mxu0 0.0
  %6828 = vmatpush1.msra.mxu0 %v6240
  %6829 = vmatprep.subr.mxu0 0.0
  %6830 = vmatpush1.msra.mxu0 %v6227
  %6831 = vmatprep.subr.mxu0 0.0
  %6832 = vmatpush1.msra.mxu0 %v6214
  %6833 = vmatprep.subr.mxu0 0.0
  %6834 = vmatpush1.msra.mxu0 %v6201
  %6835 = vmatprep.subr.mxu0 0.0
  %6836 = vmatpush1.msra.mxu0 %v6188
  %6837 = vmatprep.subr.mxu0 0.0
  %6838 = vmatpush1.msra.mxu0 %v6175
  %6839 = vmatprep.subr.mxu0 0.0
  %6840 = vmatpush1.msra.mxu0 %v6162
  %6841 = vmatprep.subr.mxu0 0.0
  %6842 = vmatpush1.msra.mxu0 %v6149
  %6843 = vmatprep.subr.mxu0 0.0
  %6844 = vmatpush1.msra.mxu0 %v6136
  %6845 = vmatprep.subr.mxu0 0.0
  %6846 = vmatpush1.msra.mxu0 %v6123
  %6847 = vmatprep.subr.mxu0 0.0
  %6848 = vmatpush1.msra.mxu0 %v6110
  %6849 = vmatprep.subr.mxu0 0.0
  %6850 = vmatpush1.msra.mxu0 %v6097
  %6851 = vmatprep.subr.mxu0 0.0
  %6852 = vmatpush1.msra.mxu0 %v6084
  %6853 = vmatprep.subr.mxu0 0.0
  %6854 = vmatpush1.msra.mxu0 %v6071
  %6855 = vmatprep.subr.mxu0 0.0
  %6856 = vmatpush1.msra.mxu0 %v6058
  %6857 = vmatprep.subr.mxu0 0.0
  %6858 = vmatpush1.msra.mxu0 %v6045
  %6859 = vmatprep.subr.mxu0 0.0
  %6860 = vmatpush2.msra.mxu0 0.0
  %6861 = vmatprep.subr.mxu0 0.0
  %6862 = vmatpush2.msra.mxu0 0.0
  %6863 = vmatprep.subr.mxu0 0.0
  %6864 = vmatpush2.msra.mxu0 0.0
  %6865 = vmatprep.subr.mxu0 0.0
  %6866 = vmatpush2.msra.mxu0 0.0
  %6867 = vmatprep.subr.mxu0 0.0
  %6868 = vmatpush2.msra.mxu0 0.0
  %6869 = vmatprep.subr.mxu0 0.0
  %6870 = vmatpush2.msra.mxu0 0.0
  %6871 = vmatprep.subr.mxu0 0.0
  %6872 = vmatpush2.msra.mxu0 0.0
  %6873 = vmatprep.subr.mxu0 0.0
  %6874 = vmatpush2.msra.mxu0 %v6399
  %6875 = vmatprep.subr.mxu0 0.0
  %6876 = vmatpush2.msra.mxu0 %v6344
  %6877 = vmatprep.subr.mxu0 0.0
  %6878 = vmatpush2.msra.mxu0 %v6331
  %6879 = vmatprep.subr.mxu0 0.0
  %6880 = vmatpush2.msra.mxu0 %v6318
  %6881 = vmatprep.subr.mxu0 0.0
  %6882 = vmatpush2.msra.mxu0 %v6305
  %6883 = vmatprep.subr.mxu0 0.0
  %6884 = vmatpush2.msra.mxu0 %v6292
  %6885 = vmatprep.subr.mxu0 0.0
  %6886 = vmatpush2.msra.mxu0 %v6279
  %6887 = vmatprep.subr.mxu0 0.0
  %6888 = vmatpush2.msra.mxu0 %v6266
  %6889 = vmatprep.subr.mxu0 0.0
  %6890 = vmatpush2.msra.mxu0 %v6253
  %6891 = vmatprep.mubr.f32.mxu0 %v6360
  %6892 = vmatmul.mubr.f32.gmra.mxu0 %v6030
  %v6893 = vpop.f32.mrf.mxu0
  %v6894 = vadd.f32 0.0, %v6893
  %v6895 = vpop.f32.mrf.mxu0
  %6896 = vdwg.mxu0
  %v6898 = vsel %vm6358, %v5662, 0
  %v6901 = vsel %vm5651, %v5975, 0
  %v6904 = vsel %vm5651, %v5976, 0
  %v6907 = vsel %vm5651, %v5977, 0
  %v6910 = vsel %vm5651, %v5978, 0
  %v6913 = vsel %vm5651, %v5979, 0
  %v6916 = vsel %vm5651, %v5980, 0
  %v6919 = vsel %vm5651, %v5981, 0
  %v6922 = vsel %vm5651, %v5982, 0
  %v6925 = vsel %vm5651, %v5983, 0
  %v6928 = vsel %vm5651, %v5984, 0
  %v6931 = vsel %vm5651, %v5985, 0
  %v6934 = vsel %vm5651, %v5986, 0
  %v6937 = vsel %vm5651, %v5987, 0
  %6939 = vmatprep.subr.mxu0 %v5859
  %6940 = vmatpush1.msra.mxu0 %v5858
  %6941 = vmatprep.subr.mxu0 %v5846
  %6942 = vmatpush1.msra.mxu0 %v5845
  %6943 = vmatprep.subr.mxu0 %v5833
  %6944 = vmatpush1.msra.mxu0 %v5832
  %6945 = vmatprep.subr.mxu0 %v5820
  %6946 = vmatpush1.msra.mxu0 %v5819
  %6947 = vmatprep.subr.mxu0 %v5807
  %6948 = vmatpush1.msra.mxu0 %v5806
  %6949 = vmatprep.subr.mxu0 %v5794
  %6950 = vmatpush1.msra.mxu0 %v5793
  %6951 = vmatprep.subr.mxu0 %v5781
  %6952 = vmatpush1.msra.mxu0 %v5780
  %6953 = vmatprep.subr.mxu0 %v5768
  %6954 = vmatpush1.msra.mxu0 %v5767
  %6955 = vmatprep.subr.mxu0 %v5755
  %6956 = vmatpush1.msra.mxu0 %v5754
  %6957 = vmatprep.subr.mxu0 %v5742
  %6958 = vmatpush1.msra.mxu0 %v5741
  %6959 = vmatprep.subr.mxu0 %v5729
  %6960 = vmatpush1.msra.mxu0 %v5728
  %6961 = vmatprep.subr.mxu0 %v5716
  %6962 = vmatpush1.msra.mxu0 %v5715
  %6963 = vmatprep.subr.mxu0 %v5703
  %6964 = vmatpush1.msra.mxu0 %v5702
  %6965 = vmatprep.subr.mxu0 %v5690
  %6966 = vmatpush1.msra.mxu0 %v5689
  %6967 = vmatprep.subr.mxu0 %v5677
  %6968 = vmatpush1.msra.mxu0 %v5676
  %6969 = vmatprep.subr.mxu0 %v5664
  %6970 = vmatpush1.msra.mxu0 %v5663
  %6971 = vmatprep.subr.mxu0 0.0
  %6972 = vmatpush2.msra.mxu0 0.0
  %6973 = vmatprep.subr.mxu0 0.0
  %6974 = vmatpush2.msra.mxu0 0.0
  %6975 = vmatprep.subr.mxu0 0.0
  %6976 = vmatpush2.msra.mxu0 0.0
  %6977 = vmatprep.subr.mxu0 0.0
  %6978 = vmatpush2.msra.mxu0 0.0
  %6979 = vmatprep.subr.mxu0 0.0
  %6980 = vmatpush2.msra.mxu0 0.0
  %6981 = vmatprep.subr.mxu0 0.0
  %6982 = vmatpush2.msra.mxu0 0.0
  %6983 = vmatprep.subr.mxu0 0.0
  %6984 = vmatpush2.msra.mxu0 0.0
  %6985 = vmatprep.subr.mxu0 %v6904
  %6986 = vmatpush2.msra.mxu0 %v6901
  %6987 = vmatprep.subr.mxu0 %v5963
  %6988 = vmatpush2.msra.mxu0 %v5962
  %6989 = vmatprep.subr.mxu0 %v5950
  %6990 = vmatpush2.msra.mxu0 %v5949
  %6991 = vmatprep.subr.mxu0 %v5937
  %6992 = vmatpush2.msra.mxu0 %v5936
  %6993 = vmatprep.subr.mxu0 %v5924
  %6994 = vmatpush2.msra.mxu0 %v5923
  %6995 = vmatprep.subr.mxu0 %v5911
  %6996 = vmatpush2.msra.mxu0 %v5910
  %6997 = vmatprep.subr.mxu0 %v5898
  %6998 = vmatpush2.msra.mxu0 %v5897
  %6999 = vmatprep.subr.mxu0 %v5885
  %7000 = vmatpush2.msra.mxu0 %v5884
  %7001 = vmatprep.subr.mxu0 %v5872
  %7002 = vmatpush2.msra.mxu0 %v5871
  %7003 = vmatprep.mubr.f32.mxu0 %v6898
  %7004 = vmatmul.mubr.f32.gmra.mxu0 %v5661
  %v7005 = vpop.f32.mrf.mxu0
  %v7006 = vadd.f32 %v6468, %v7005
  %v7007 = vpop.f32.mrf.mxu0
  %v7008 = vadd.f32 %v6470, %v7007
  %7009 = vdwg.mxu0
  %7010 = vmatprep.subr.mxu0 %v5861
  %7011 = vmatpush1.msra.mxu0 %v5860
  %7012 = vmatprep.subr.mxu0 %v5848
  %7013 = vmatpush1.msra.mxu0 %v5847
  %7014 = vmatprep.subr.mxu0 %v5835
  %7015 = vmatpush1.msra.mxu0 %v5834
  %7016 = vmatprep.subr.mxu0 %v5822
  %7017 = vmatpush1.msra.mxu0 %v5821
  %7018 = vmatprep.subr.mxu0 %v5809
  %7019 = vmatpush1.msra.mxu0 %v5808
  %7020 = vmatprep.subr.mxu0 %v5796
  %7021 = vmatpush1.msra.mxu0 %v5795
  %7022 = vmatprep.subr.mxu0 %v5783
  %7023 = vmatpush1.msra.mxu0 %v5782
  %7024 = vmatprep.subr.mxu0 %v5770
  %7025 = vmatpush1.msra.mxu0 %v5769
  %7026 = vmatprep.subr.mxu0 %v5757
  %7027 = vmatpush1.msra.mxu0 %v5756
  %7028 = vmatprep.subr.mxu0 %v5744
  %7029 = vmatpush1.msra.mxu0 %v5743
  %7030 = vmatprep.subr.mxu0 %v5731
  %7031 = vmatpush1.msra.mxu0 %v5730
  %7032 = vmatprep.subr.mxu0 %v5718
  %7033 = vmatpush1.msra.mxu0 %v5717
  %7034 = vmatprep.subr.mxu0 %v5705
  %7035 = vmatpush1.msra.mxu0 %v5704
  %7036 = vmatprep.subr.mxu0 %v5692
  %7037 = vmatpush1.msra.mxu0 %v5691
  %7038 = vmatprep.subr.mxu0 %v5679
  %7039 = vmatpush1.msra.mxu0 %v5678
  %7040 = vmatprep.subr.mxu0 %v5666
  %7041 = vmatpush1.msra.mxu0 %v5665
  %7042 = vmatprep.subr.mxu0 0.0
  %7043 = vmatpush2.msra.mxu0 0.0
  %7044 = vmatprep.subr.mxu0 0.0
  %7045 = vmatpush2.msra.mxu0 0.0
  %7046 = vmatprep.subr.mxu0 0.0
  %7047 = vmatpush2.msra.mxu0 0.0
  %7048 = vmatprep.subr.mxu0 0.0
  %7049 = vmatpush2.msra.mxu0 0.0
  %7050 = vmatprep.subr.mxu0 0.0
  %7051 = vmatpush2.msra.mxu0 0.0
  %7052 = vmatprep.subr.mxu0 0.0
  %7053 = vmatpush2.msra.mxu0 0.0
  %7054 = vmatprep.subr.mxu0 0.0
  %7055 = vmatpush2.msra.mxu0 0.0
  %7056 = vmatprep.subr.mxu0 %v6910
  %7057 = vmatpush2.msra.mxu0 %v6907
  %7058 = vmatprep.subr.mxu0 %v5965
  %7059 = vmatpush2.msra.mxu0 %v5964
  %7060 = vmatprep.subr.mxu0 %v5952
  %7061 = vmatpush2.msra.mxu0 %v5951
  %7062 = vmatprep.subr.mxu0 %v5939
  %7063 = vmatpush2.msra.mxu0 %v5938
  %7064 = vmatprep.subr.mxu0 %v5926
  %7065 = vmatpush2.msra.mxu0 %v5925
  %7066 = vmatprep.subr.mxu0 %v5913
  %7067 = vmatpush2.msra.mxu0 %v5912
  %7068 = vmatprep.subr.mxu0 %v5900
  %7069 = vmatpush2.msra.mxu0 %v5899
  %7070 = vmatprep.subr.mxu0 %v5887
  %7071 = vmatpush2.msra.mxu0 %v5886
  %7072 = vmatprep.subr.mxu0 %v5874
  %7073 = vmatpush2.msra.mxu0 %v5873
  %7074 = vmatprep.mubr.f32.mxu0 %v6898
  %7075 = vmatmul.mubr.f32.gmra.mxu0 %v5661
  %v7076 = vpop.f32.mrf.mxu0
  %v7077 = vadd.f32 %v6539, %v7076
  %v7078 = vpop.f32.mrf.mxu0
  %v7079 = vadd.f32 %v6541, %v7078
  %7080 = vdwg.mxu0
  %7081 = vmatprep.subr.mxu0 %v5863
  %7082 = vmatpush1.msra.mxu0 %v5862
  %7083 = vmatprep.subr.mxu0 %v5850
  %7084 = vmatpush1.msra.mxu0 %v5849
  %7085 = vmatprep.subr.mxu0 %v5837
  %7086 = vmatpush1.msra.mxu0 %v5836
  %7087 = vmatprep.subr.mxu0 %v5824
  %7088 = vmatpush1.msra.mxu0 %v5823
  %7089 = vmatprep.subr.mxu0 %v5811
  %7090 = vmatpush1.msra.mxu0 %v5810
  %7091 = vmatprep.subr.mxu0 %v5798
  %7092 = vmatpush1.msra.mxu0 %v5797
  %7093 = vmatprep.subr.mxu0 %v5785
  %7094 = vmatpush1.msra.mxu0 %v5784
  %7095 = vmatprep.subr.mxu0 %v5772
  %7096 = vmatpush1.msra.mxu0 %v5771
  %7097 = vmatprep.subr.mxu0 %v5759
  %7098 = vmatpush1.msra.mxu0 %v5758
  %7099 = vmatprep.subr.mxu0 %v5746
  %7100 = vmatpush1.msra.mxu0 %v5745
  %7101 = vmatprep.subr.mxu0 %v5733
  %7102 = vmatpush1.msra.mxu0 %v5732
  %7103 = vmatprep.subr.mxu0 %v5720
  %7104 = vmatpush1.msra.mxu0 %v5719
  %7105 = vmatprep.subr.mxu0 %v5707
  %7106 = vmatpush1.msra.mxu0 %v5706
  %7107 = vmatprep.subr.mxu0 %v5694
  %7108 = vmatpush1.msra.mxu0 %v5693
  %7109 = vmatprep.subr.mxu0 %v5681
  %7110 = vmatpush1.msra.mxu0 %v5680
  %7111 = vmatprep.subr.mxu0 %v5668
  %7112 = vmatpush1.msra.mxu0 %v5667
  %7113 = vmatprep.subr.mxu0 0.0
  %7114 = vmatpush2.msra.mxu0 0.0
  %7115 = vmatprep.subr.mxu0 0.0
  %7116 = vmatpush2.msra.mxu0 0.0
  %7117 = vmatprep.subr.mxu0 0.0
  %7118 = vmatpush2.msra.mxu0 0.0
  %7119 = vmatprep.subr.mxu0 0.0
  %7120 = vmatpush2.msra.mxu0 0.0
  %7121 = vmatprep.subr.mxu0 0.0
  %7122 = vmatpush2.msra.mxu0 0.0
  %7123 = vmatprep.subr.mxu0 0.0
  %7124 = vmatpush2.msra.mxu0 0.0
  %7125 = vmatprep.subr.mxu0 0.0
  %7126 = vmatpush2.msra.mxu0 0.0
  %7127 = vmatprep.subr.mxu0 %v6916
  %7128 = vmatpush2.msra.mxu0 %v6913
  %7129 = vmatprep.subr.mxu0 %v5967
  %7130 = vmatpush2.msra.mxu0 %v5966
  %7131 = vmatprep.subr.mxu0 %v5954
  %7132 = vmatpush2.msra.mxu0 %v5953
  %7133 = vmatprep.subr.mxu0 %v5941
  %7134 = vmatpush2.msra.mxu0 %v5940
  %7135 = vmatprep.subr.mxu0 %v5928
  %7136 = vmatpush2.msra.mxu0 %v5927
  %7137 = vmatprep.subr.mxu0 %v5915
  %7138 = vmatpush2.msra.mxu0 %v5914
  %7139 = vmatprep.subr.mxu0 %v5902
  %7140 = vmatpush2.msra.mxu0 %v5901
  %7141 = vmatprep.subr.mxu0 %v5889
  %7142 = vmatpush2.msra.mxu0 %v5888
  %7143 = vmatprep.subr.mxu0 %v5876
  %7144 = vmatpush2.msra.mxu0 %v5875
  %7145 = vmatprep.mubr.f32.mxu0 %v6898
  %7146 = vmatmul.mubr.f32.gmra.mxu0 %v5661
  %v7147 = vpop.f32.mrf.mxu0
  %v7148 = vadd.f32 %v6610, %v7147
  %v7149 = vpop.f32.mrf.mxu0
  %v7150 = vadd.f32 %v6612, %v7149
  %7151 = vdwg.mxu0
  %7152 = vmatprep.subr.mxu0 %v5865
  %7153 = vmatpush1.msra.mxu0 %v5864
  %7154 = vmatprep.subr.mxu0 %v5852
  %7155 = vmatpush1.msra.mxu0 %v5851
  %7156 = vmatprep.subr.mxu0 %v5839
  %7157 = vmatpush1.msra.mxu0 %v5838
  %7158 = vmatprep.subr.mxu0 %v5826
  %7159 = vmatpush1.msra.mxu0 %v5825
  %7160 = vmatprep.subr.mxu0 %v5813
  %7161 = vmatpush1.msra.mxu0 %v5812
  %7162 = vmatprep.subr.mxu0 %v5800
  %7163 = vmatpush1.msra.mxu0 %v5799
  %7164 = vmatprep.subr.mxu0 %v5787
  %7165 = vmatpush1.msra.mxu0 %v5786
  %7166 = vmatprep.subr.mxu0 %v5774
  %7167 = vmatpush1.msra.mxu0 %v5773
  %7168 = vmatprep.subr.mxu0 %v5761
  %7169 = vmatpush1.msra.mxu0 %v5760
  %7170 = vmatprep.subr.mxu0 %v5748
  %7171 = vmatpush1.msra.mxu0 %v5747
  %7172 = vmatprep.subr.mxu0 %v5735
  %7173 = vmatpush1.msra.mxu0 %v5734
  %7174 = vmatprep.subr.mxu0 %v5722
  %7175 = vmatpush1.msra.mxu0 %v5721
  %7176 = vmatprep.subr.mxu0 %v5709
  %7177 = vmatpush1.msra.mxu0 %v5708
  %7178 = vmatprep.subr.mxu0 %v5696
  %7179 = vmatpush1.msra.mxu0 %v5695
  %7180 = vmatprep.subr.mxu0 %v5683
  %7181 = vmatpush1.msra.mxu0 %v5682
  %7182 = vmatprep.subr.mxu0 %v5670
  %7183 = vmatpush1.msra.mxu0 %v5669
  %7184 = vmatprep.subr.mxu0 0.0
  %7185 = vmatpush2.msra.mxu0 0.0
  %7186 = vmatprep.subr.mxu0 0.0
  %7187 = vmatpush2.msra.mxu0 0.0
  %7188 = vmatprep.subr.mxu0 0.0
  %7189 = vmatpush2.msra.mxu0 0.0
  %7190 = vmatprep.subr.mxu0 0.0
  %7191 = vmatpush2.msra.mxu0 0.0
  %7192 = vmatprep.subr.mxu0 0.0
  %7193 = vmatpush2.msra.mxu0 0.0
  %7194 = vmatprep.subr.mxu0 0.0
  %7195 = vmatpush2.msra.mxu0 0.0
  %7196 = vmatprep.subr.mxu0 0.0
  %7197 = vmatpush2.msra.mxu0 0.0
  %7198 = vmatprep.subr.mxu0 %v6922
  %7199 = vmatpush2.msra.mxu0 %v6919
  %7200 = vmatprep.subr.mxu0 %v5969
  %7201 = vmatpush2.msra.mxu0 %v5968
  %7202 = vmatprep.subr.mxu0 %v5956
  %7203 = vmatpush2.msra.mxu0 %v5955
  %7204 = vmatprep.subr.mxu0 %v5943
  %7205 = vmatpush2.msra.mxu0 %v5942
  %7206 = vmatprep.subr.mxu0 %v5930
  %7207 = vmatpush2.msra.mxu0 %v5929
  %7208 = vmatprep.subr.mxu0 %v5917
  %7209 = vmatpush2.msra.mxu0 %v5916
  %7210 = vmatprep.subr.mxu0 %v5904
  %7211 = vmatpush2.msra.mxu0 %v5903
  %7212 = vmatprep.subr.mxu0 %v5891
  %7213 = vmatpush2.msra.mxu0 %v5890
  %7214 = vmatprep.subr.mxu0 %v5878
  %7215 = vmatpush2.msra.mxu0 %v5877
  %7216 = vmatprep.mubr.f32.mxu0 %v6898
  %7217 = vmatmul.mubr.f32.gmra.mxu0 %v5661
  %v7218 = vpop.f32.mrf.mxu0
  %v7219 = vadd.f32 %v6681, %v7218
  %v7220 = vpop.f32.mrf.mxu0
  %v7221 = vadd.f32 %v6683, %v7220
  %7222 = vdwg.mxu0
  %7223 = vmatprep.subr.mxu0 %v5867
  %7224 = vmatpush1.msra.mxu0 %v5866
  %7225 = vmatprep.subr.mxu0 %v5854
  %7226 = vmatpush1.msra.mxu0 %v5853
  %7227 = vmatprep.subr.mxu0 %v5841
  %7228 = vmatpush1.msra.mxu0 %v5840
  %7229 = vmatprep.subr.mxu0 %v5828
  %7230 = vmatpush1.msra.mxu0 %v5827
  %7231 = vmatprep.subr.mxu0 %v5815
  %7232 = vmatpush1.msra.mxu0 %v5814
  %7233 = vmatprep.subr.mxu0 %v5802
  %7234 = vmatpush1.msra.mxu0 %v5801
  %7235 = vmatprep.subr.mxu0 %v5789
  %7236 = vmatpush1.msra.mxu0 %v5788
  %7237 = vmatprep.subr.mxu0 %v5776
  %7238 = vmatpush1.msra.mxu0 %v5775
  %7239 = vmatprep.subr.mxu0 %v5763
  %7240 = vmatpush1.msra.mxu0 %v5762
  %7241 = vmatprep.subr.mxu0 %v5750
  %7242 = vmatpush1.msra.mxu0 %v5749
  %7243 = vmatprep.subr.mxu0 %v5737
  %7244 = vmatpush1.msra.mxu0 %v5736
  %7245 = vmatprep.subr.mxu0 %v5724
  %7246 = vmatpush1.msra.mxu0 %v5723
  %7247 = vmatprep.subr.mxu0 %v5711
  %7248 = vmatpush1.msra.mxu0 %v5710
  %7249 = vmatprep.subr.mxu0 %v5698
  %7250 = vmatpush1.msra.mxu0 %v5697
  %7251 = vmatprep.subr.mxu0 %v5685
  %7252 = vmatpush1.msra.mxu0 %v5684
  %7253 = vmatprep.subr.mxu0 %v5672
  %7254 = vmatpush1.msra.mxu0 %v5671
  %7255 = vmatprep.subr.mxu0 0.0
  %7256 = vmatpush2.msra.mxu0 0.0
  %7257 = vmatprep.subr.mxu0 0.0
  %7258 = vmatpush2.msra.mxu0 0.0
  %7259 = vmatprep.subr.mxu0 0.0
  %7260 = vmatpush2.msra.mxu0 0.0
  %7261 = vmatprep.subr.mxu0 0.0
  %7262 = vmatpush2.msra.mxu0 0.0
  %7263 = vmatprep.subr.mxu0 0.0
  %7264 = vmatpush2.msra.mxu0 0.0
  %7265 = vmatprep.subr.mxu0 0.0
  %7266 = vmatpush2.msra.mxu0 0.0
  %7267 = vmatprep.subr.mxu0 0.0
  %7268 = vmatpush2.msra.mxu0 0.0
  %7269 = vmatprep.subr.mxu0 %v6928
  %7270 = vmatpush2.msra.mxu0 %v6925
  %7271 = vmatprep.subr.mxu0 %v5971
  %7272 = vmatpush2.msra.mxu0 %v5970
  %7273 = vmatprep.subr.mxu0 %v5958
  %7274 = vmatpush2.msra.mxu0 %v5957
  %7275 = vmatprep.subr.mxu0 %v5945
  %7276 = vmatpush2.msra.mxu0 %v5944
  %7277 = vmatprep.subr.mxu0 %v5932
  %7278 = vmatpush2.msra.mxu0 %v5931
  %7279 = vmatprep.subr.mxu0 %v5919
  %7280 = vmatpush2.msra.mxu0 %v5918
  %7281 = vmatprep.subr.mxu0 %v5906
  %7282 = vmatpush2.msra.mxu0 %v5905
  %7283 = vmatprep.subr.mxu0 %v5893
  %7284 = vmatpush2.msra.mxu0 %v5892
  %7285 = vmatprep.subr.mxu0 %v5880
  %7286 = vmatpush2.msra.mxu0 %v5879
  %7287 = vmatprep.mubr.f32.mxu0 %v6898
  %7288 = vmatmul.mubr.f32.gmra.mxu0 %v5661
  %v7289 = vpop.f32.mrf.mxu0
  %v7290 = vadd.f32 %v6752, %v7289
  %v7291 = vpop.f32.mrf.mxu0
  %v7292 = vadd.f32 %v6754, %v7291
  %7293 = vdwg.mxu0
  %7294 = vmatprep.subr.mxu0 %v5869
  %7295 = vmatpush1.msra.mxu0 %v5868
  %7296 = vmatprep.subr.mxu0 %v5856
  %7297 = vmatpush1.msra.mxu0 %v5855
  %7298 = vmatprep.subr.mxu0 %v5843
  %7299 = vmatpush1.msra.mxu0 %v5842
  %7300 = vmatprep.subr.mxu0 %v5830
  %7301 = vmatpush1.msra.mxu0 %v5829
  %7302 = vmatprep.subr.mxu0 %v5817
  %7303 = vmatpush1.msra.mxu0 %v5816
  %7304 = vmatprep.subr.mxu0 %v5804
  %7305 = vmatpush1.msra.mxu0 %v5803
  %7306 = vmatprep.subr.mxu0 %v5791
  %7307 = vmatpush1.msra.mxu0 %v5790
  %7308 = vmatprep.subr.mxu0 %v5778
  %7309 = vmatpush1.msra.mxu0 %v5777
  %7310 = vmatprep.subr.mxu0 %v5765
  %7311 = vmatpush1.msra.mxu0 %v5764
  %7312 = vmatprep.subr.mxu0 %v5752
  %7313 = vmatpush1.msra.mxu0 %v5751
  %7314 = vmatprep.subr.mxu0 %v5739
  %7315 = vmatpush1.msra.mxu0 %v5738
  %7316 = vmatprep.subr.mxu0 %v5726
  %7317 = vmatpush1.msra.mxu0 %v5725
  %7318 = vmatprep.subr.mxu0 %v5713
  %7319 = vmatpush1.msra.mxu0 %v5712
  %7320 = vmatprep.subr.mxu0 %v5700
  %7321 = vmatpush1.msra.mxu0 %v5699
  %7322 = vmatprep.subr.mxu0 %v5687
  %7323 = vmatpush1.msra.mxu0 %v5686
  %7324 = vmatprep.subr.mxu0 %v5674
  %7325 = vmatpush1.msra.mxu0 %v5673
  %7326 = vmatprep.subr.mxu0 0.0
  %7327 = vmatpush2.msra.mxu0 0.0
  %7328 = vmatprep.subr.mxu0 0.0
  %7329 = vmatpush2.msra.mxu0 0.0
  %7330 = vmatprep.subr.mxu0 0.0
  %7331 = vmatpush2.msra.mxu0 0.0
  %7332 = vmatprep.subr.mxu0 0.0
  %7333 = vmatpush2.msra.mxu0 0.0
  %7334 = vmatprep.subr.mxu0 0.0
  %7335 = vmatpush2.msra.mxu0 0.0
  %7336 = vmatprep.subr.mxu0 0.0
  %7337 = vmatpush2.msra.mxu0 0.0
  %7338 = vmatprep.subr.mxu0 0.0
  %7339 = vmatpush2.msra.mxu0 0.0
  %7340 = vmatprep.subr.mxu0 %v6934
  %7341 = vmatpush2.msra.mxu0 %v6931
  %7342 = vmatprep.subr.mxu0 %v5973
  %7343 = vmatpush2.msra.mxu0 %v5972
  %7344 = vmatprep.subr.mxu0 %v5960
  %7345 = vmatpush2.msra.mxu0 %v5959
  %7346 = vmatprep.subr.mxu0 %v5947
  %7347 = vmatpush2.msra.mxu0 %v5946
  %7348 = vmatprep.subr.mxu0 %v5934
  %7349 = vmatpush2.msra.mxu0 %v5933
  %7350 = vmatprep.subr.mxu0 %v5921
  %7351 = vmatpush2.msra.mxu0 %v5920
  %7352 = vmatprep.subr.mxu0 %v5908
  %7353 = vmatpush2.msra.mxu0 %v5907
  %7354 = vmatprep.subr.mxu0 %v5895
  %7355 = vmatpush2.msra.mxu0 %v5894
  %7356 = vmatprep.subr.mxu0 %v5882
  %7357 = vmatpush2.msra.mxu0 %v5881
  %7358 = vmatprep.mubr.f32.mxu0 %v6898
  %7359 = vmatmul.mubr.f32.gmra.mxu0 %v5661
  %v7360 = vpop.f32.mrf.mxu0
  %v7361 = vadd.f32 %v6823, %v7360
  %v7362 = vpop.f32.mrf.mxu0
  %v7363 = vadd.f32 %v6825, %v7362
  %7364 = vdwg.mxu0
  %7365 = vmatprep.subr.mxu0 0.0
  %7366 = vmatpush1.msra.mxu0 %v5870
  %7367 = vmatprep.subr.mxu0 0.0
  %7368 = vmatpush1.msra.mxu0 %v5857
  %7369 = vmatprep.subr.mxu0 0.0
  %7370 = vmatpush1.msra.mxu0 %v5844
  %7371 = vmatprep.subr.mxu0 0.0
  %7372 = vmatpush1.msra.mxu0 %v5831
  %7373 = vmatprep.subr.mxu0 0.0
  %7374 = vmatpush1.msra.mxu0 %v5818
  %7375 = vmatprep.subr.mxu0 0.0
  %7376 = vmatpush1.msra.mxu0 %v5805
  %7377 = vmatprep.subr.mxu0 0.0
  %7378 = vmatpush1.msra.mxu0 %v5792
  %7379 = vmatprep.subr.mxu0 0.0
  %7380 = vmatpush1.msra.mxu0 %v5779
  %7381 = vmatprep.subr.mxu0 0.0
  %7382 = vmatpush1.msra.mxu0 %v5766
  %7383 = vmatprep.subr.mxu0 0.0
  %7384 = vmatpush1.msra.mxu0 %v5753
  %7385 = vmatprep.subr.mxu0 0.0
  %7386 = vmatpush1.msra.mxu0 %v5740
  %7387 = vmatprep.subr.mxu0 0.0
  %7388 = vmatpush1.msra.mxu0 %v5727
  %7389 = vmatprep.subr.mxu0 0.0
  %7390 = vmatpush1.msra.mxu0 %v5714
  %7391 = vmatprep.subr.mxu0 0.0
  %7392 = vmatpush1.msra.mxu0 %v5701
  %7393 = vmatprep.subr.mxu0 0.0
  %7394 = vmatpush1.msra.mxu0 %v5688
  %7395 = vmatprep.subr.mxu0 0.0
  %7396 = vmatpush1.msra.mxu0 %v5675
  %7397 = vmatprep.subr.mxu0 0.0
  %7398 = vmatpush2.msra.mxu0 0.0
  %7399 = vmatprep.subr.mxu0 0.0
  %7400 = vmatpush2.msra.mxu0 0.0
  %7401 = vmatprep.subr.mxu0 0.0
  %7402 = vmatpush2.msra.mxu0 0.0
  %7403 = vmatprep.subr.mxu0 0.0
  %7404 = vmatpush2.msra.mxu0 0.0
  %7405 = vmatprep.subr.mxu0 0.0
  %7406 = vmatpush2.msra.mxu0 0.0
  %7407 = vmatprep.subr.mxu0 0.0
  %7408 = vmatpush2.msra.mxu0 0.0
  %7409 = vmatprep.subr.mxu0 0.0
  %7410 = vmatpush2.msra.mxu0 0.0
  %7411 = vmatprep.subr.mxu0 0.0
  %7412 = vmatpush2.msra.mxu0 %v6937
  %7413 = vmatprep.subr.mxu0 0.0
  %7414 = vmatpush2.msra.mxu0 %v5974
  %7415 = vmatprep.subr.mxu0 0.0
  %7416 = vmatpush2.msra.mxu0 %v5961
  %7417 = vmatprep.subr.mxu0 0.0
  %7418 = vmatpush2.msra.mxu0 %v5948
  %7419 = vmatprep.subr.mxu0 0.0
  %7420 = vmatpush2.msra.mxu0 %v5935
  %7421 = vmatprep.subr.mxu0 0.0
  %7422 = vmatpush2.msra.mxu0 %v5922
  %7423 = vmatprep.subr.mxu0 0.0
  %7424 = vmatpush2.msra.mxu0 %v5909
  %7425 = vmatprep.subr.mxu0 0.0
  %7426 = vmatpush2.msra.mxu0 %v5896
  %7427 = vmatprep.subr.mxu0 0.0
  %7428 = vmatpush2.msra.mxu0 %v5883
  %7429 = vmatprep.mubr.f32.mxu0 %v6898
  %7430 = vmatmul.mubr.f32.gmra.mxu0 %v5661
  %v7431 = vpop.f32.mrf.mxu0
  %v7432 = vadd.f32 %v6894, %v7431
  %v7433 = vpop.f32.mrf.mxu0
  %7434 = vdwg.mxu0
  %v7435 = vrot.slane %v914, 2
  %v7436 = vrot.slane %v916, 2
  %v7439 = vrot.slane %v1583, 1
  %v7440 = vrot.slane %v1585, 1
  %v7443 = vrot.slane %v2921, 7
  %v7444 = vrot.slane %v2923, 7
  %v7447 = vrot.slane %v3590, 6
  %v7448 = vrot.slane %v3592, 6
  %v7451 = vrot.slane %v4259, 5
  %v7452 = vrot.slane %v4261, 5
  %v7455 = vrot.slane %v4928, 4
  %v7456 = vrot.slane %v4930, 4
  %v7459 = vrot.slane %v5597, 3
  %v7460 = vrot.slane %v5599, 3
  %v7463 = vsel %vm5643, %v7435, %v7439
  %v7464 = vsel %vm5643, %v7436, %v7440
  %v7465 = vsel %vm5646, %v7463, %v2252
  %v7466 = vsel %vm5646, %v7464, %v2254
  %v7467 = vsel %vm318, %v7465, %v7443
  %v7468 = vsel %vm318, %v7466, %v7444
  %v7469 = vsel %vm5651, %v7467, %v7447
  %v7470 = vsel %vm5651, %v7468, %v7448
  %v7471 = vsel %vm5654, %v7469, %v7451
  %v7472 = vsel %vm5654, %v7470, %v7452
  %v7473 = vsel %vm5657, %v7471, %v7455
  %v7474 = vsel %vm5657, %v7472, %v7456
  %v7475 = vsel %vm5660, %v7473, %v7459
  %v7476 = vsel %vm5660, %v7474, %v7460
  %s7477 = scalar_lea.vmem %s4, 5200
  %v7478 = vld [vmem:[%s7477] sm:$0xff]
  %v7479 = vld [vmem:[%s7477 + $0x8] sm:$0xff]
  %v7480 = vld [vmem:[%s7477 + $0x10] sm:$0xff]
  %v7481 = vld [vmem:[%s7477 + $0x18] sm:$0xff]
  %v7482 = vld [vmem:[%s7477 + $0x20] sm:$0xff]
  %v7483 = vld [vmem:[%s7477 + $0x28] sm:$0xff]
  %v7484 = vld [vmem:[%s7477 + $0x30] sm:$0xff]
  %v7485 = vld [vmem:[%s7477 + $0x38] sm:$0xff]
  %v7486 = vld [vmem:[%s7477 + $0x40] sm:$0xff]
  %v7487 = vld [vmem:[%s7477 + $0x48] sm:$0xff]
  %v7488 = vld [vmem:[%s7477 + $0x50] sm:$0xff]
  %v7489 = vld [vmem:[%s7477 + $0x58] sm:$0xff]
  %v7490 = vld [vmem:[%s7477 + $0x60] sm:$0xff]
  %v7491 = vld [vmem:[%s7477 + $0x68] sm:$0xff]
  %v7492 = vld [vmem:[%s7477 + $0x70] sm:$0xff]
  %v7493 = vld [vmem:[%s7477 + $0x78] sm:$0xff]
  %v7494 = vld [vmem:[%s7477 + $0x80] sm:$0xff]
  %v7495 = vld [vmem:[%s7477 + $0x88] sm:$0xff]
  %v7496 = vld [vmem:[%s7477 + $0x90] sm:$0xff]
  %v7497 = vld [vmem:[%s7477 + $0x98] sm:$0xff]
  %v7498 = vld [vmem:[%s7477 + $0xa0] sm:$0xff]
  %v7499 = vld [vmem:[%s7477 + $0xa8] sm:$0xff]
  %v7500 = vld [vmem:[%s7477 + $0xb0] sm:$0xff]
  %v7501 = vld [vmem:[%s7477 + $0xb8] sm:$0xff]
  %v7502 = vld [vmem:[%s7477 + $0xc0] sm:$0xff]
  %v7503 = vld [vmem:[%s7477 + $0xc8] sm:$0xff]
  %v7504 = vld [vmem:[%s7477 + $0xd0] sm:$0xff]
  %v7505 = vld [vmem:[%s7477 + $0xd8] sm:$0xff]
  %v7506 = vld [vmem:[%s7477 + $0xe0] sm:$0xff]
  %v7507 = vld [vmem:[%s7477 + $0xe8] sm:$0xff]
  %v7508 = vld [vmem:[%s7477 + $0xf0] sm:$0xff]
  %v7509 = vld [vmem:[%s7477 + $0xf8] sm:$0xff]
  %v7510 = vld [vmem:[%s7477 + $0x100] sm:$0xff]
  %v7511 = vld [vmem:[%s7477 + $0x108] sm:$0xff]
  %v7512 = vld [vmem:[%s7477 + $0x110] sm:$0xff]
  %v7513 = vld [vmem:[%s7477 + $0x118] sm:$0xff]
  %v7514 = vld [vmem:[%s7477 + $0x120] sm:$0xff]
  %v7515 = vld [vmem:[%s7477 + $0x128] sm:$0xff]
  %v7516 = vld [vmem:[%s7477 + $0x130] sm:$0xff]
  %v7517 = vld [vmem:[%s7477 + $0x138] sm:$0xff]
  %v7518 = vld [vmem:[%s7477 + $0x140] sm:$0xff]
  %v7519 = vld [vmem:[%s7477 + $0x148] sm:$0xff]
  %v7520 = vld [vmem:[%s7477 + $0x150] sm:$0xff]
  %v7521 = vld [vmem:[%s7477 + $0x158] sm:$0xff]
  %v7522 = vld [vmem:[%s7477 + $0x160] sm:$0xff]
  %v7523 = vld [vmem:[%s7477 + $0x168] sm:$0xff]
  %v7524 = vld [vmem:[%s7477 + $0x170] sm:$0xff]
  %v7525 = vld [vmem:[%s7477 + $0x178] sm:$0xff]
  %v7526 = vld [vmem:[%s7477 + $0x180] sm:$0xff]
  %v7527 = vld [vmem:[%s7477 + $0x188] sm:$0xff]
  %v7528 = vld [vmem:[%s7477 + $0x190] sm:$0xff]
  %v7529 = vld [vmem:[%s7477 + $0x198] sm:$0xff]
  %v7530 = vld [vmem:[%s7477 + $0x1a0] sm:$0xff]
  %v7531 = vld [vmem:[%s7477 + $0x1a8] sm:$0xff]
  %v7532 = vld [vmem:[%s7477 + $0x1b0] sm:$0xff]
  %v7533 = vld [vmem:[%s7477 + $0x1b8] sm:$0xff]
  %v7534 = vld [vmem:[%s7477 + $0x1c0] sm:$0xff]
  %v7535 = vld [vmem:[%s7477 + $0x1c8] sm:$0xff]
  %v7536 = vld [vmem:[%s7477 + $0x1d0] sm:$0xff]
  %v7537 = vld [vmem:[%s7477 + $0x1d8] sm:$0xff]
  %v7538 = vld [vmem:[%s7477 + $0x1e0] sm:$0xff]
  %v7539 = vld [vmem:[%s7477 + $0x1e8] sm:$0xff]
  %v7540 = vld [vmem:[%s7477 + $0x1f0] sm:$0xff]
  %v7541 = vld [vmem:[%s7477 + $0x1f8] sm:$0xff]
  %v7542 = vld [vmem:[%s7477 + $0x200] sm:$0xff]
  %v7543 = vld [vmem:[%s7477 + $0x208] sm:$0xff]
  %v7544 = vld [vmem:[%s7477 + $0x210] sm:$0xff]
  %v7545 = vld [vmem:[%s7477 + $0x218] sm:$0xff]
  %v7546 = vld [vmem:[%s7477 + $0x220] sm:$0xff]
  %v7547 = vld [vmem:[%s7477 + $0x228] sm:$0xff]
  %v7548 = vld [vmem:[%s7477 + $0x230] sm:$0xff]
  %v7549 = vld [vmem:[%s7477 + $0x238] sm:$0xff]
  %v7550 = vld [vmem:[%s7477 + $0x240] sm:$0xff]
  %v7551 = vld [vmem:[%s7477 + $0x248] sm:$0xff]
  %v7552 = vld [vmem:[%s7477 + $0x250] sm:$0xff]
  %v7553 = vld [vmem:[%s7477 + $0x258] sm:$0xff]
  %v7554 = vld [vmem:[%s7477 + $0x260] sm:$0xff]
  %v7555 = vld [vmem:[%s7477 + $0x268] sm:$0xff]
  %v7556 = vld [vmem:[%s7477 + $0x270] sm:$0xff]
  %v7557 = vld [vmem:[%s7477 + $0x278] sm:$0xff]
  %v7558 = vld [vmem:[%s7477 + $0x280] sm:$0xff]
  %v7559 = vld [vmem:[%s7477 + $0x288] sm:$0xff]
  %v7560 = vld [vmem:[%s7477 + $0x290] sm:$0xff]
  %v7561 = vld [vmem:[%s7477 + $0x298] sm:$0xff]
  %v7562 = vld [vmem:[%s7477 + $0x2a0] sm:$0xff]
  %v7563 = vld [vmem:[%s7477 + $0x2a8] sm:$0xff]
  %v7564 = vld [vmem:[%s7477 + $0x2b0] sm:$0xff]
  %v7565 = vld [vmem:[%s7477 + $0x2b8] sm:$0xff]
  %v7566 = vld [vmem:[%s7477 + $0x2c0] sm:$0xff]
  %v7567 = vld [vmem:[%s7477 + $0x2c8] sm:$0xff]
  %v7568 = vld [vmem:[%s7477 + $0x2d0] sm:$0xff]
  %v7569 = vld [vmem:[%s7477 + $0x2d8] sm:$0xff]
  %v7570 = vld [vmem:[%s7477 + $0x2e0] sm:$0xff]
  %v7571 = vld [vmem:[%s7477 + $0x2e8] sm:$0xff]
  %v7572 = vld [vmem:[%s7477 + $0x2f0] sm:$0xff]
  %v7573 = vld [vmem:[%s7477 + $0x2f8] sm:$0xff]
  %v7574 = vld [vmem:[%s7477 + $0x300] sm:$0xff]
  %v7575 = vld [vmem:[%s7477 + $0x308] sm:$0xff]
  %v7576 = vld [vmem:[%s7477 + $0x310] sm:$0xff]
  %v7577 = vld [vmem:[%s7477 + $0x318] sm:$0xff]
  %v7578 = vld [vmem:[%s7477 + $0x320] sm:$0xff]
  %v7579 = vld [vmem:[%s7477 + $0x328] sm:$0xff]
  %v7580 = vld [vmem:[%s7477 + $0x330] sm:$0xff]
  %v7581 = vld [vmem:[%s7477 + $0x338] sm:$0xff]
  %v7582 = vld [vmem:[%s7477 + $0x340] sm:$0xff]
  %v7583 = vld [vmem:[%s7477 + $0x348] sm:$0xff]
  %v7584 = vld [vmem:[%s7477 + $0x350] sm:$0xff]
  %v7585 = vld [vmem:[%s7477 + $0x358] sm:$0xff]
  %v7586 = vld [vmem:[%s7477 + $0x360] sm:$0xff]
  %v7587 = vld [vmem:[%s7477 + $0x368] sm:$0xff]
  %v7588 = vld [vmem:[%s7477 + $0x370] sm:$0xff]
  %v7589 = vld [vmem:[%s7477 + $0x378] sm:$0xff]
  %v7590 = vld [vmem:[%s7477 + $0x380] sm:$0xff]
  %v7591 = vld [vmem:[%s7477 + $0x388] sm:$0xff]
  %v7592 = vld [vmem:[%s7477 + $0x390] sm:$0xff]
  %v7593 = vld [vmem:[%s7477 + $0x398] sm:$0xff]
  %v7594 = vld [vmem:[%s7477 + $0x3a0] sm:$0xff]
  %v7595 = vld [vmem:[%s7477 + $0x3a8] sm:$0xff]
  %v7596 = vld [vmem:[%s7477 + $0x3b0] sm:$0xff]
  %v7597 = vld [vmem:[%s7477 + $0x3b8] sm:$0xff]
  %v7598 = vld [vmem:[%s7477 + $0x3c0] sm:$0xff]
  %v7599 = vld [vmem:[%s7477 + $0x3c8] sm:$0xff]
  %v7600 = vld [vmem:[%s7477 + $0x3d0] sm:$0xff]
  %v7601 = vld [vmem:[%s7477 + $0x3d8] sm:$0xff]
  %v7602 = vld [vmem:[%s7477 + $0x3e0] sm:$0xff]
  %v7603 = vld [vmem:[%s7477 + $0x3e8] sm:$0xff]
  %v7604 = vld [vmem:[%s7477 + $0x3f0] sm:$0xff]
  %v7605 = vld [vmem:[%s7477 + $0x3f8] sm:$0xff]
  %v7606 = vld [vmem:[%s7477 + $0x400] sm:$0xff]
  %v7607 = vld [vmem:[%s7477 + $0x408] sm:$0xff]
  %v7608 = vld [vmem:[%s7477 + $0x410] sm:$0xff]
  %v7609 = vld [vmem:[%s7477 + $0x418] sm:$0xff]
  %v7610 = vld [vmem:[%s7477 + $0x420] sm:$0xff]
  %v7611 = vld [vmem:[%s7477 + $0x428] sm:$0xff]
  %v7612 = vld [vmem:[%s7477 + $0x430] sm:$0xff]
  %v7613 = vld [vmem:[%s7477 + $0x438] sm:$0xff]
  %v7614 = vld [vmem:[%s7477 + $0x440] sm:$0xff]
  %v7615 = vld [vmem:[%s7477 + $0x448] sm:$0xff]
  %v7616 = vld [vmem:[%s7477 + $0x450] sm:$0xff]
  %v7617 = vld [vmem:[%s7477 + $0x458] sm:$0xff]
  %v7618 = vld [vmem:[%s7477 + $0x460] sm:$0xff]
  %v7619 = vld [vmem:[%s7477 + $0x468] sm:$0xff]
  %v7620 = vld [vmem:[%s7477 + $0x470] sm:$0xff]
  %v7621 = vld [vmem:[%s7477 + $0x478] sm:$0xff]
  %v7622 = vld [vmem:[%s7477 + $0x480] sm:$0xff]
  %v7623 = vld [vmem:[%s7477 + $0x488] sm:$0xff]
  %v7624 = vld [vmem:[%s7477 + $0x490] sm:$0xff]
  %v7625 = vld [vmem:[%s7477 + $0x498] sm:$0xff]
  %v7626 = vld [vmem:[%s7477 + $0x4a0] sm:$0xff]
  %v7627 = vld [vmem:[%s7477 + $0x4a8] sm:$0xff]
  %v7628 = vld [vmem:[%s7477 + $0x4b0] sm:$0xff]
  %v7629 = vld [vmem:[%s7477 + $0x4b8] sm:$0xff]
  %v7630 = vld [vmem:[%s7477 + $0x4c0] sm:$0xff]
  %v7631 = vld [vmem:[%s7477 + $0x4c8] sm:$0xff]
  %v7632 = vld [vmem:[%s7477 + $0x4d0] sm:$0xff]
  %v7633 = vld [vmem:[%s7477 + $0x4d8] sm:$0xff]
  %v7634 = vld [vmem:[%s7477 + $0x4e0] sm:$0xff]
  %v7635 = vld [vmem:[%s7477 + $0x4e8] sm:$0xff]
  %v7636 = vld [vmem:[%s7477 + $0x4f0] sm:$0xff]
  %v7637 = vld [vmem:[%s7477 + $0x4f8] sm:$0xff]
  %v7638 = vld [vmem:[%s7477 + $0x500] sm:$0xff]
  %v7639 = vld [vmem:[%s7477 + $0x508] sm:$0xff]
  %v7640 = vld [vmem:[%s7477 + $0x510] sm:$0xff]
  %v7641 = vld [vmem:[%s7477 + $0x518] sm:$0xff]
  %v7642 = vld [vmem:[%s7477 + $0x520] sm:$0xff]
  %v7643 = vld [vmem:[%s7477 + $0x528] sm:$0xff]
  %v7644 = vld [vmem:[%s7477 + $0x530] sm:$0xff]
  %v7645 = vld [vmem:[%s7477 + $0x538] sm:$0xff]
  %v7646 = vld [vmem:[%s7477 + $0x540] sm:$0xff]
  %v7647 = vld [vmem:[%s7477 + $0x548] sm:$0xff]
  %v7648 = vld [vmem:[%s7477 + $0x550] sm:$0xff]
  %v7649 = vld [vmem:[%s7477 + $0x558] sm:$0xff]
  %v7650 = vld [vmem:[%s7477 + $0x560] sm:$0xff]
  %v7651 = vld [vmem:[%s7477 + $0x568] sm:$0xff]
  %v7652 = vld [vmem:[%s7477 + $0x570] sm:$0xff]
  %v7653 = vld [vmem:[%s7477 + $0x578] sm:$0xff]
  %v7654 = vld [vmem:[%s7477 + $0x580] sm:$0xff]
  %v7655 = vld [vmem:[%s7477 + $0x588] sm:$0xff]
  %v7656 = vld [vmem:[%s7477 + $0x590] sm:$0xff]
  %v7657 = vld [vmem:[%s7477 + $0x598] sm:$0xff]
  %v7658 = vld [vmem:[%s7477 + $0x5a0] sm:$0xff]
  %v7659 = vld [vmem:[%s7477 + $0x5a8] sm:$0xff]
  %v7660 = vld [vmem:[%s7477 + $0x5b0] sm:$0xff]
  %v7661 = vld [vmem:[%s7477 + $0x5b8] sm:$0xff]
  %v7662 = vld [vmem:[%s7477 + $0x5c0] sm:$0xff]
  %v7663 = vld [vmem:[%s7477 + $0x5c8] sm:$0xff]
  %v7664 = vld [vmem:[%s7477 + $0x5d0] sm:$0xff]
  %v7665 = vld [vmem:[%s7477 + $0x5d8] sm:$0xff]
  %v7666 = vld [vmem:[%s7477 + $0x5e0] sm:$0xff]
  %v7667 = vld [vmem:[%s7477 + $0x5e8] sm:$0xff]
  %v7668 = vld [vmem:[%s7477 + $0x5f0] sm:$0xff]
  %v7669 = vld [vmem:[%s7477 + $0x5f8] sm:$0xff]
  %v7670 = vld [vmem:[%s7477 + $0x600] sm:$0xff]
  %v7671 = vld [vmem:[%s7477 + $0x608] sm:$0xff]
  %v7672 = vld [vmem:[%s7477 + $0x610] sm:$0xff]
  %v7673 = vld [vmem:[%s7477 + $0x618] sm:$0xff]
  %v7674 = vld [vmem:[%s7477 + $0x620] sm:$0xff]
  %v7675 = vld [vmem:[%s7477 + $0x628] sm:$0xff]
  %v7676 = vld [vmem:[%s7477 + $0x630] sm:$0xff]
  %v7677 = vld [vmem:[%s7477 + $0x638] sm:$0xff]
  %v7678 = vld [vmem:[%s7477 + $0x640] sm:$0xff]
  %v7679 = vld [vmem:[%s7477 + $0x648] sm:$0xff]
  %v7680 = vld [vmem:[%s7477 + $0x650] sm:$0xff]
  %v7681 = vld [vmem:[%s7477 + $0x658] sm:$0xff]
  %v7682 = vld [vmem:[%s7477 + $0x660] sm:$0xff]
  %v7683 = vld [vmem:[%s7477 + $0x668] sm:$0xff]
  %v7684 = vld [vmem:[%s7477 + $0x670] sm:$0xff]
  %v7685 = vld [vmem:[%s7477 + $0x678] sm:$0xff]
  %v7686 = vld [vmem:[%s7477 + $0x680] sm:$0xff]
  %v7687 = vld [vmem:[%s7477 + $0x688] sm:$0xff]
  %v7688 = vld [vmem:[%s7477 + $0x690] sm:$0xff]
  %v7689 = vld [vmem:[%s7477 + $0x698] sm:$0xff]
  %v7690 = vld [vmem:[%s7477 + $0x6a0] sm:$0xff]
  %v7691 = vld [vmem:[%s7477 + $0x6a8] sm:$0xff]
  %v7692 = vld [vmem:[%s7477 + $0x6b0] sm:$0xff]
  %v7693 = vld [vmem:[%s7477 + $0x6b8] sm:$0xff]
  %v7694 = vld [vmem:[%s7477 + $0x6c0] sm:$0xff]
  %v7695 = vld [vmem:[%s7477 + $0x6c8] sm:$0xff]
  %v7696 = vld [vmem:[%s7477 + $0x6d0] sm:$0xff]
  %v7697 = vld [vmem:[%s7477 + $0x6d8] sm:$0xff]
  %v7698 = vld [vmem:[%s7477 + $0x6e0] sm:$0xff]
  %v7699 = vld [vmem:[%s7477 + $0x6e8] sm:$0xff]
  %v7700 = vld [vmem:[%s7477 + $0x6f0] sm:$0xff]
  %v7701 = vld [vmem:[%s7477 + $0x6f8] sm:$0xff]
  %v7702 = vld [vmem:[%s7477 + $0x700] sm:$0xff]
  %v7703 = vld [vmem:[%s7477 + $0x708] sm:$0xff]
  %v7704 = vld [vmem:[%s7477 + $0x710] sm:$0xff]
  %v7705 = vld [vmem:[%s7477 + $0x718] sm:$0xff]
  %v7706 = vld [vmem:[%s7477 + $0x720] sm:$0xff]
  %v7707 = vld [vmem:[%s7477 + $0x728] sm:$0xff]
  %v7708 = vld [vmem:[%s7477 + $0x730] sm:$0xff]
  %v7709 = vld [vmem:[%s7477 + $0x738] sm:$0xff]
  %v7710 = vld [vmem:[%s7477 + $0x740] sm:$0xff]
  %v7711 = vld [vmem:[%s7477 + $0x748] sm:$0xff]
  %v7712 = vld [vmem:[%s7477 + $0x750] sm:$0xff]
  %v7713 = vld [vmem:[%s7477 + $0x758] sm:$0xff]
  %v7714 = vld [vmem:[%s7477 + $0x760] sm:$0xff]
  %v7715 = vld [vmem:[%s7477 + $0x768] sm:$0xff]
  %v7716 = vld [vmem:[%s7477 + $0x770] sm:$0xff]
  %v7717 = vld [vmem:[%s7477 + $0x778] sm:$0xff]
  %v7718 = vld [vmem:[%s7477 + $0x780] sm:$0xff]
  %v7719 = vld [vmem:[%s7477 + $0x788] sm:$0xff]
  %v7720 = vld [vmem:[%s7477 + $0x790] sm:$0xff]
  %v7721 = vld [vmem:[%s7477 + $0x798] sm:$0xff]
  %v7722 = vld [vmem:[%s7477 + $0x7a0] sm:$0xff]
  %v7723 = vld [vmem:[%s7477 + $0x7a8] sm:$0xff]
  %v7724 = vld [vmem:[%s7477 + $0x7b0] sm:$0xff]
  %v7725 = vld [vmem:[%s7477 + $0x7b8] sm:$0xff]
  %v7726 = vld [vmem:[%s7477 + $0x7c0] sm:$0xff]
  %v7727 = vld [vmem:[%s7477 + $0x7c8] sm:$0xff]
  %v7728 = vld [vmem:[%s7477 + $0x7d0] sm:$0xff]
  %v7729 = vld [vmem:[%s7477 + $0x7d8] sm:$0xff]
  %v7730 = vld [vmem:[%s7477 + $0x7e0] sm:$0xff]
  %v7731 = vld [vmem:[%s7477 + $0x7e8] sm:$0xff]
  %v7732 = vld [vmem:[%s7477 + $0x7f0] sm:$0xff]
  %v7733 = vld [vmem:[%s7477 + $0x7f8] sm:$0xff]
  %v7734 = vld [vmem:[%s7477 + $0x800] sm:$0xff]
  %v7735 = vld [vmem:[%s7477 + $0x808] sm:$0xff]
  %v7736 = vld [vmem:[%s7477 + $0x810] sm:$0xff]
  %v7737 = vld [vmem:[%s7477 + $0x818] sm:$0xff]
  %v7738 = vld [vmem:[%s7477 + $0x820] sm:$0xff]
  %v7739 = vld [vmem:[%s7477 + $0x828] sm:$0xff]
  %v7740 = vld [vmem:[%s7477 + $0x830] sm:$0xff]
  %v7741 = vld [vmem:[%s7477 + $0x838] sm:$0xff]
  %v7742 = vld [vmem:[%s7477 + $0x840] sm:$0xff]
  %v7743 = vld [vmem:[%s7477 + $0x848] sm:$0xff]
  %v7744 = vld [vmem:[%s7477 + $0x850] sm:$0xff]
  %v7745 = vld [vmem:[%s7477 + $0x858] sm:$0xff]
  %v7746 = vld [vmem:[%s7477 + $0x860] sm:$0xff]
  %v7747 = vld [vmem:[%s7477 + $0x868] sm:$0xff]
  %v7748 = vld [vmem:[%s7477 + $0x870] sm:$0xff]
  %v7749 = vld [vmem:[%s7477 + $0x878] sm:$0xff]
  %v7750 = vld [vmem:[%s7477 + $0x880] sm:$0xff]
  %v7751 = vld [vmem:[%s7477 + $0x888] sm:$0xff]
  %v7752 = vld [vmem:[%s7477 + $0x890] sm:$0xff]
  %v7753 = vld [vmem:[%s7477 + $0x898] sm:$0xff]
  %v7754 = vld [vmem:[%s7477 + $0x8a0] sm:$0xff]
  %v7755 = vld [vmem:[%s7477 + $0x8a8] sm:$0xff]
  %v7756 = vld [vmem:[%s7477 + $0x8b0] sm:$0xff]
  %v7757 = vld [vmem:[%s7477 + $0x8b8] sm:$0xff]
  %v7758 = vld [vmem:[%s7477 + $0x8c0] sm:$0xff]
  %v7759 = vld [vmem:[%s7477 + $0x8c8] sm:$0xff]
  %v7760 = vld [vmem:[%s7477 + $0x8d0] sm:$0xff]
  %v7761 = vld [vmem:[%s7477 + $0x8d8] sm:$0xff]
  %v7762 = vld [vmem:[%s7477 + $0x8e0] sm:$0xff]
  %v7763 = vld [vmem:[%s7477 + $0x8e8] sm:$0xff]
  %v7764 = vld [vmem:[%s7477 + $0x8f0] sm:$0xff]
  %v7765 = vld [vmem:[%s7477 + $0x8f8] sm:$0xff]
  %v7766 = vld [vmem:[%s7477 + $0x900] sm:$0xff]
  %v7767 = vld [vmem:[%s7477 + $0x908] sm:$0xff]
  %v7768 = vld [vmem:[%s7477 + $0x910] sm:$0xff]
  %v7769 = vld [vmem:[%s7477 + $0x918] sm:$0xff]
  %v7770 = vld [vmem:[%s7477 + $0x920] sm:$0xff]
  %v7771 = vld [vmem:[%s7477 + $0x928] sm:$0xff]
  %v7772 = vld [vmem:[%s7477 + $0x930] sm:$0xff]
  %v7773 = vld [vmem:[%s7477 + $0x938] sm:$0xff]
  %v7774 = vld [vmem:[%s7477 + $0x940] sm:$0xff]
  %v7775 = vld [vmem:[%s7477 + $0x948] sm:$0xff]
  %v7776 = vld [vmem:[%s7477 + $0x950] sm:$0xff]
  %v7777 = vld [vmem:[%s7477 + $0x958] sm:$0xff]
  %v7778 = vld [vmem:[%s7477 + $0x960] sm:$0xff]
  %v7779 = vld [vmem:[%s7477 + $0x968] sm:$0xff]
  %v7780 = vld [vmem:[%s7477 + $0x970] sm:$0xff]
  %v7781 = vld [vmem:[%s7477 + $0x978] sm:$0xff]
  %v7782 = vld [vmem:[%s7477 + $0x980] sm:$0xff]
  %v7783 = vld [vmem:[%s7477 + $0x988] sm:$0xff]
  %v7784 = vld [vmem:[%s7477 + $0x990] sm:$0xff]
  %v7785 = vld [vmem:[%s7477 + $0x998] sm:$0xff]
  %v7786 = vld [vmem:[%s7477 + $0x9a0] sm:$0xff]
  %v7787 = vld [vmem:[%s7477 + $0x9a8] sm:$0xff]
  %v7788 = vld [vmem:[%s7477 + $0x9b0] sm:$0xff]
  %v7789 = vld [vmem:[%s7477 + $0x9b8] sm:$0xff]
  %v7790 = vld [vmem:[%s7477 + $0x9c0] sm:$0xf]
  %v7791 = vld [vmem:[%s7477 + $0x9c8] sm:$0xf]
  %v7792 = vld [vmem:[%s7477 + $0x9d0] sm:$0xf]
  %v7793 = vld [vmem:[%s7477 + $0x9d8] sm:$0xf]
  %v7794 = vld [vmem:[%s7477 + $0x9e0] sm:$0xf]
  %v7795 = vld [vmem:[%s7477 + $0x9e8] sm:$0xf]
  %v7796 = vld [vmem:[%s7477 + $0x9f0] sm:$0xf]
  %v7797 = vld [vmem:[%s7477 + $0x9f8] sm:$0xf]
  %v7798 = vld [vmem:[%s7477 + $0xa00] sm:$0xf]
  %v7799 = vld [vmem:[%s7477 + $0xa08] sm:$0xf]
  %v7800 = vld [vmem:[%s7477 + $0xa10] sm:$0xf]
  %v7801 = vld [vmem:[%s7477 + $0xa18] sm:$0xf]
  %v7802 = vld [vmem:[%s7477 + $0xa20] sm:$0xf]
  %v7804 = vsel %vm6358, %v7476, 0
  %v7807 = vsel %vm5651, %v7790, 0
  %v7810 = vsel %vm5651, %v7791, 0
  %v7813 = vsel %vm5651, %v7792, 0
  %v7816 = vsel %vm5651, %v7793, 0
  %v7819 = vsel %vm5651, %v7794, 0
  %v7822 = vsel %vm5651, %v7795, 0
  %v7825 = vsel %vm5651, %v7796, 0
  %v7828 = vsel %vm5651, %v7797, 0
  %v7831 = vsel %vm5651, %v7798, 0
  %v7834 = vsel %vm5651, %v7799, 0
  %v7837 = vsel %vm5651, %v7800, 0
  %v7840 = vsel %vm5651, %v7801, 0
  %v7843 = vsel %vm5651, %v7802, 0
  %7845 = vmatprep.subr.mxu0 %v7674
  %7846 = vmatpush1.msra.mxu0 %v7673
  %7847 = vmatprep.subr.mxu0 %v7661
  %7848 = vmatpush1.msra.mxu0 %v7660
  %7849 = vmatprep.subr.mxu0 %v7648
  %7850 = vmatpush1.msra.mxu0 %v7647
  %7851 = vmatprep.subr.mxu0 %v7635
  %7852 = vmatpush1.msra.mxu0 %v7634
  %7853 = vmatprep.subr.mxu0 %v7622
  %7854 = vmatpush1.msra.mxu0 %v7621
  %7855 = vmatprep.subr.mxu0 %v7609
  %7856 = vmatpush1.msra.mxu0 %v7608
  %7857 = vmatprep.subr.mxu0 %v7596
  %7858 = vmatpush1.msra.mxu0 %v7595
  %7859 = vmatprep.subr.mxu0 %v7583
  %7860 = vmatpush1.msra.mxu0 %v7582
  %7861 = vmatprep.subr.mxu0 %v7570
  %7862 = vmatpush1.msra.mxu0 %v7569
  %7863 = vmatprep.subr.mxu0 %v7557
  %7864 = vmatpush1.msra.mxu0 %v7556
  %7865 = vmatprep.subr.mxu0 %v7544
  %7866 = vmatpush1.msra.mxu0 %v7543
  %7867 = vmatprep.subr.mxu0 %v7531
  %7868 = vmatpush1.msra.mxu0 %v7530
  %7869 = vmatprep.subr.mxu0 %v7518
  %7870 = vmatpush1.msra.mxu0 %v7517
  %7871 = vmatprep.subr.mxu0 %v7505
  %7872 = vmatpush1.msra.mxu0 %v7504
  %7873 = vmatprep.subr.mxu0 %v7492
  %7874 = vmatpush1.msra.mxu0 %v7491
  %7875 = vmatprep.subr.mxu0 %v7479
  %7876 = vmatpush1.msra.mxu0 %v7478
  %7877 = vmatprep.subr.mxu0 0.0
  %7878 = vmatpush2.msra.mxu0 0.0
  %7879 = vmatprep.subr.mxu0 0.0
  %7880 = vmatpush2.msra.mxu0 0.0
  %7881 = vmatprep.subr.mxu0 0.0
  %7882 = vmatpush2.msra.mxu0 0.0
  %7883 = vmatprep.subr.mxu0 0.0
  %7884 = vmatpush2.msra.mxu0 0.0
  %7885 = vmatprep.subr.mxu0 0.0
  %7886 = vmatpush2.msra.mxu0 0.0
  %7887 = vmatprep.subr.mxu0 0.0
  %7888 = vmatpush2.msra.mxu0 0.0
  %7889 = vmatprep.subr.mxu0 0.0
  %7890 = vmatpush2.msra.mxu0 0.0
  %7891 = vmatprep.subr.mxu0 %v7810
  %7892 = vmatpush2.msra.mxu0 %v7807
  %7893 = vmatprep.subr.mxu0 %v7778
  %7894 = vmatpush2.msra.mxu0 %v7777
  %7895 = vmatprep.subr.mxu0 %v7765
  %7896 = vmatpush2.msra.mxu0 %v7764
  %7897 = vmatprep.subr.mxu0 %v7752
  %7898 = vmatpush2.msra.mxu0 %v7751
  %7899 = vmatprep.subr.mxu0 %v7739
  %7900 = vmatpush2.msra.mxu0 %v7738
  %7901 = vmatprep.subr.mxu0 %v7726
  %7902 = vmatpush2.msra.mxu0 %v7725
  %7903 = vmatprep.subr.mxu0 %v7713
  %7904 = vmatpush2.msra.mxu0 %v7712
  %7905 = vmatprep.subr.mxu0 %v7700
  %7906 = vmatpush2.msra.mxu0 %v7699
  %7907 = vmatprep.subr.mxu0 %v7687
  %7908 = vmatpush2.msra.mxu0 %v7686
  %7909 = vmatprep.mubr.f32.mxu0 %v7804
  %7910 = vmatmul.mubr.f32.gmra.mxu0 %v7475
  %v7911 = vpop.f32.mrf.mxu0
  %v7912 = vadd.f32 0.0, %v7911
  %v7913 = vpop.f32.mrf.mxu0
  %v7914 = vadd.f32 0.0, %v7913
  %7915 = vdwg.mxu0
  %7916 = vmatprep.subr.mxu0 %v7676
  %7917 = vmatpush1.msra.mxu0 %v7675
  %7918 = vmatprep.subr.mxu0 %v7663
  %7919 = vmatpush1.msra.mxu0 %v7662
  %7920 = vmatprep.subr.mxu0 %v7650
  %7921 = vmatpush1.msra.mxu0 %v7649
  %7922 = vmatprep.subr.mxu0 %v7637
  %7923 = vmatpush1.msra.mxu0 %v7636
  %7924 = vmatprep.subr.mxu0 %v7624
  %7925 = vmatpush1.msra.mxu0 %v7623
  %7926 = vmatprep.subr.mxu0 %v7611
  %7927 = vmatpush1.msra.mxu0 %v7610
  %7928 = vmatprep.subr.mxu0 %v7598
  %7929 = vmatpush1.msra.mxu0 %v7597
  %7930 = vmatprep.subr.mxu0 %v7585
  %7931 = vmatpush1.msra.mxu0 %v7584
  %7932 = vmatprep.subr.mxu0 %v7572
  %7933 = vmatpush1.msra.mxu0 %v7571
  %7934 = vmatprep.subr.mxu0 %v7559
  %7935 = vmatpush1.msra.mxu0 %v7558
  %7936 = vmatprep.subr.mxu0 %v7546
  %7937 = vmatpush1.msra.mxu0 %v7545
  %7938 = vmatprep.subr.mxu0 %v7533
  %7939 = vmatpush1.msra.mxu0 %v7532
  %7940 = vmatprep.subr.mxu0 %v7520
  %7941 = vmatpush1.msra.mxu0 %v7519
  %7942 = vmatprep.subr.mxu0 %v7507
  %7943 = vmatpush1.msra.mxu0 %v7506
  %7944 = vmatprep.subr.mxu0 %v7494
  %7945 = vmatpush1.msra.mxu0 %v7493
  %7946 = vmatprep.subr.mxu0 %v7481
  %7947 = vmatpush1.msra.mxu0 %v7480
  %7948 = vmatprep.subr.mxu0 0.0
  %7949 = vmatpush2.msra.mxu0 0.0
  %7950 = vmatprep.subr.mxu0 0.0
  %7951 = vmatpush2.msra.mxu0 0.0
  %7952 = vmatprep.subr.mxu0 0.0
  %7953 = vmatpush2.msra.mxu0 0.0
  %7954 = vmatprep.subr.mxu0 0.0
  %7955 = vmatpush2.msra.mxu0 0.0
  %7956 = vmatprep.subr.mxu0 0.0
  %7957 = vmatpush2.msra.mxu0 0.0
  %7958 = vmatprep.subr.mxu0 0.0
  %7959 = vmatpush2.msra.mxu0 0.0
  %7960 = vmatprep.subr.mxu0 0.0
  %7961 = vmatpush2.msra.mxu0 0.0
  %7962 = vmatprep.subr.mxu0 %v7816
  %7963 = vmatpush2.msra.mxu0 %v7813
  %7964 = vmatprep.subr.mxu0 %v7780
  %7965 = vmatpush2.msra.mxu0 %v7779
  %7966 = vmatprep.subr.mxu0 %v7767
  %7967 = vmatpush2.msra.mxu0 %v7766
  %7968 = vmatprep.subr.mxu0 %v7754
  %7969 = vmatpush2.msra.mxu0 %v7753
  %7970 = vmatprep.subr.mxu0 %v7741
  %7971 = vmatpush2.msra.mxu0 %v7740
  %7972 = vmatprep.subr.mxu0 %v7728
  %7973 = vmatpush2.msra.mxu0 %v7727
  %7974 = vmatprep.subr.mxu0 %v7715
  %7975 = vmatpush2.msra.mxu0 %v7714
  %7976 = vmatprep.subr.mxu0 %v7702
  %7977 = vmatpush2.msra.mxu0 %v7701
  %7978 = vmatprep.subr.mxu0 %v7689
  %7979 = vmatpush2.msra.mxu0 %v7688
  %7980 = vmatprep.mubr.f32.mxu0 %v7804
  %7981 = vmatmul.mubr.f32.gmra.mxu0 %v7475
  %v7982 = vpop.f32.mrf.mxu0
  %v7983 = vadd.f32 0.0, %v7982
  %v7984 = vpop.f32.mrf.mxu0
  %v7985 = vadd.f32 0.0, %v7984
  %7986 = vdwg.mxu0
  %7987 = vmatprep.subr.mxu0 %v7678
  %7988 = vmatpush1.msra.mxu0 %v7677
  %7989 = vmatprep.subr.mxu0 %v7665
  %7990 = vmatpush1.msra.mxu0 %v7664
  %7991 = vmatprep.subr.mxu0 %v7652
  %7992 = vmatpush1.msra.mxu0 %v7651
  %7993 = vmatprep.subr.mxu0 %v7639
  %7994 = vmatpush1.msra.mxu0 %v7638
  %7995 = vmatprep.subr.mxu0 %v7626
  %7996 = vmatpush1.msra.mxu0 %v7625
  %7997 = vmatprep.subr.mxu0 %v7613
  %7998 = vmatpush1.msra.mxu0 %v7612
  %7999 = vmatprep.subr.mxu0 %v7600
  %8000 = vmatpush1.msra.mxu0 %v7599
  %8001 = vmatprep.subr.mxu0 %v7587
  %8002 = vmatpush1.msra.mxu0 %v7586
  %8003 = vmatprep.subr.mxu0 %v7574
  %8004 = vmatpush1.msra.mxu0 %v7573
  %8005 = vmatprep.subr.mxu0 %v7561
  %8006 = vmatpush1.msra.mxu0 %v7560
  %8007 = vmatprep.subr.mxu0 %v7548
  %8008 = vmatpush1.msra.mxu0 %v7547
  %8009 = vmatprep.subr.mxu0 %v7535
  %8010 = vmatpush1.msra.mxu0 %v7534
  %8011 = vmatprep.subr.mxu0 %v7522
  %8012 = vmatpush1.msra.mxu0 %v7521
  %8013 = vmatprep.subr.mxu0 %v7509
  %8014 = vmatpush1.msra.mxu0 %v7508
  %8015 = vmatprep.subr.mxu0 %v7496
  %8016 = vmatpush1.msra.mxu0 %v7495
  %8017 = vmatprep.subr.mxu0 %v7483
  %8018 = vmatpush1.msra.mxu0 %v7482
  %8019 = vmatprep.subr.mxu0 0.0
  %8020 = vmatpush2.msra.mxu0 0.0
  %8021 = vmatprep.subr.mxu0 0.0
  %8022 = vmatpush2.msra.mxu0 0.0
  %8023 = vmatprep.subr.mxu0 0.0
  %8024 = vmatpush2.msra.mxu0 0.0
  %8025 = vmatprep.subr.mxu0 0.0
  %8026 = vmatpush2.msra.mxu0 0.0
  %8027 = vmatprep.subr.mxu0 0.0
  %8028 = vmatpush2.msra.mxu0 0.0
  %8029 = vmatprep.subr.mxu0 0.0
  %8030 = vmatpush2.msra.mxu0 0.0
  %8031 = vmatprep.subr.mxu0 0.0
  %8032 = vmatpush2.msra.mxu0 0.0
  %8033 = vmatprep.subr.mxu0 %v7822
  %8034 = vmatpush2.msra.mxu0 %v7819
  %8035 = vmatprep.subr.mxu0 %v7782
  %8036 = vmatpush2.msra.mxu0 %v7781
  %8037 = vmatprep.subr.mxu0 %v7769
  %8038 = vmatpush2.msra.mxu0 %v7768
  %8039 = vmatprep.subr.mxu0 %v7756
  %8040 = vmatpush2.msra.mxu0 %v7755
  %8041 = vmatprep.subr.mxu0 %v7743
  %8042 = vmatpush2.msra.mxu0 %v7742
  %8043 = vmatprep.subr.mxu0 %v7730
  %8044 = vmatpush2.msra.mxu0 %v7729
  %8045 = vmatprep.subr.mxu0 %v7717
  %8046 = vmatpush2.msra.mxu0 %v7716
  %8047 = vmatprep.subr.mxu0 %v7704
  %8048 = vmatpush2.msra.mxu0 %v7703
  %8049 = vmatprep.subr.mxu0 %v7691
  %8050 = vmatpush2.msra.mxu0 %v7690
  %8051 = vmatprep.mubr.f32.mxu0 %v7804
  %8052 = vmatmul.mubr.f32.gmra.mxu0 %v7475
  %v8053 = vpop.f32.mrf.mxu0
  %v8054 = vadd.f32 0.0, %v8053
  %v8055 = vpop.f32.mrf.mxu0
  %v8056 = vadd.f32 0.0, %v8055
  %8057 = vdwg.mxu0
  %8058 = vmatprep.subr.mxu0 %v7680
  %8059 = vmatpush1.msra.mxu0 %v7679
  %8060 = vmatprep.subr.mxu0 %v7667
  %8061 = vmatpush1.msra.mxu0 %v7666
  %8062 = vmatprep.subr.mxu0 %v7654
  %8063 = vmatpush1.msra.mxu0 %v7653
  %8064 = vmatprep.subr.mxu0 %v7641
  %8065 = vmatpush1.msra.mxu0 %v7640
  %8066 = vmatprep.subr.mxu0 %v7628
  %8067 = vmatpush1.msra.mxu0 %v7627
  %8068 = vmatprep.subr.mxu0 %v7615
  %8069 = vmatpush1.msra.mxu0 %v7614
  %8070 = vmatprep.subr.mxu0 %v7602
  %8071 = vmatpush1.msra.mxu0 %v7601
  %8072 = vmatprep.subr.mxu0 %v7589
  %8073 = vmatpush1.msra.mxu0 %v7588
  %8074 = vmatprep.subr.mxu0 %v7576
  %8075 = vmatpush1.msra.mxu0 %v7575
  %8076 = vmatprep.subr.mxu0 %v7563
  %8077 = vmatpush1.msra.mxu0 %v7562
  %8078 = vmatprep.subr.mxu0 %v7550
  %8079 = vmatpush1.msra.mxu0 %v7549
  %8080 = vmatprep.subr.mxu0 %v7537
  %8081 = vmatpush1.msra.mxu0 %v7536
  %8082 = vmatprep.subr.mxu0 %v7524
  %8083 = vmatpush1.msra.mxu0 %v7523
  %8084 = vmatprep.subr.mxu0 %v7511
  %8085 = vmatpush1.msra.mxu0 %v7510
  %8086 = vmatprep.subr.mxu0 %v7498
  %8087 = vmatpush1.msra.mxu0 %v7497
  %8088 = vmatprep.subr.mxu0 %v7485
  %8089 = vmatpush1.msra.mxu0 %v7484
  %8090 = vmatprep.subr.mxu0 0.0
  %8091 = vmatpush2.msra.mxu0 0.0
  %8092 = vmatprep.subr.mxu0 0.0
  %8093 = vmatpush2.msra.mxu0 0.0
  %8094 = vmatprep.subr.mxu0 0.0
  %8095 = vmatpush2.msra.mxu0 0.0
  %8096 = vmatprep.subr.mxu0 0.0
  %8097 = vmatpush2.msra.mxu0 0.0
  %8098 = vmatprep.subr.mxu0 0.0
  %8099 = vmatpush2.msra.mxu0 0.0
  %8100 = vmatprep.subr.mxu0 0.0
  %8101 = vmatpush2.msra.mxu0 0.0
  %8102 = vmatprep.subr.mxu0 0.0
  %8103 = vmatpush2.msra.mxu0 0.0
  %8104 = vmatprep.subr.mxu0 %v7828
  %8105 = vmatpush2.msra.mxu0 %v7825
  %8106 = vmatprep.subr.mxu0 %v7784
  %8107 = vmatpush2.msra.mxu0 %v7783
  %8108 = vmatprep.subr.mxu0 %v7771
  %8109 = vmatpush2.msra.mxu0 %v7770
  %8110 = vmatprep.subr.mxu0 %v7758
  %8111 = vmatpush2.msra.mxu0 %v7757
  %8112 = vmatprep.subr.mxu0 %v7745
  %8113 = vmatpush2.msra.mxu0 %v7744
  %8114 = vmatprep.subr.mxu0 %v7732
  %8115 = vmatpush2.msra.mxu0 %v7731
  %8116 = vmatprep.subr.mxu0 %v7719
  %8117 = vmatpush2.msra.mxu0 %v7718
  %8118 = vmatprep.subr.mxu0 %v7706
  %8119 = vmatpush2.msra.mxu0 %v7705
  %8120 = vmatprep.subr.mxu0 %v7693
  %8121 = vmatpush2.msra.mxu0 %v7692
  %8122 = vmatprep.mubr.f32.mxu0 %v7804
  %8123 = vmatmul.mubr.f32.gmra.mxu0 %v7475
  %v8124 = vpop.f32.mrf.mxu0
  %v8125 = vadd.f32 0.0, %v8124
  %v8126 = vpop.f32.mrf.mxu0
  %v8127 = vadd.f32 0.0, %v8126
  %8128 = vdwg.mxu0
  %8129 = vmatprep.subr.mxu0 %v7682
  %8130 = vmatpush1.msra.mxu0 %v7681
  %8131 = vmatprep.subr.mxu0 %v7669
  %8132 = vmatpush1.msra.mxu0 %v7668
  %8133 = vmatprep.subr.mxu0 %v7656
  %8134 = vmatpush1.msra.mxu0 %v7655
  %8135 = vmatprep.subr.mxu0 %v7643
  %8136 = vmatpush1.msra.mxu0 %v7642
  %8137 = vmatprep.subr.mxu0 %v7630
  %8138 = vmatpush1.msra.mxu0 %v7629
  %8139 = vmatprep.subr.mxu0 %v7617
  %8140 = vmatpush1.msra.mxu0 %v7616
  %8141 = vmatprep.subr.mxu0 %v7604
  %8142 = vmatpush1.msra.mxu0 %v7603
  %8143 = vmatprep.subr.mxu0 %v7591
  %8144 = vmatpush1.msra.mxu0 %v7590
  %8145 = vmatprep.subr.mxu0 %v7578
  %8146 = vmatpush1.msra.mxu0 %v7577
  %8147 = vmatprep.subr.mxu0 %v7565
  %8148 = vmatpush1.msra.mxu0 %v7564
  %8149 = vmatprep.subr.mxu0 %v7552
  %8150 = vmatpush1.msra.mxu0 %v7551
  %8151 = vmatprep.subr.mxu0 %v7539
  %8152 = vmatpush1.msra.mxu0 %v7538
  %8153 = vmatprep.subr.mxu0 %v7526
  %8154 = vmatpush1.msra.mxu0 %v7525
  %8155 = vmatprep.subr.mxu0 %v7513
  %8156 = vmatpush1.msra.mxu0 %v7512
  %8157 = vmatprep.subr.mxu0 %v7500
  %8158 = vmatpush1.msra.mxu0 %v7499
  %8159 = vmatprep.subr.mxu0 %v7487
  %8160 = vmatpush1.msra.mxu0 %v7486
  %8161 = vmatprep.subr.mxu0 0.0
  %8162 = vmatpush2.msra.mxu0 0.0
  %8163 = vmatprep.subr.mxu0 0.0
  %8164 = vmatpush2.msra.mxu0 0.0
  %8165 = vmatprep.subr.mxu0 0.0
  %8166 = vmatpush2.msra.mxu0 0.0
  %8167 = vmatprep.subr.mxu0 0.0
  %8168 = vmatpush2.msra.mxu0 0.0
  %8169 = vmatprep.subr.mxu0 0.0
  %8170 = vmatpush2.msra.mxu0 0.0
  %8171 = vmatprep.subr.mxu0 0.0
  %8172 = vmatpush2.msra.mxu0 0.0
  %8173 = vmatprep.subr.mxu0 0.0
  %8174 = vmatpush2.msra.mxu0 0.0
  %8175 = vmatprep.subr.mxu0 %v7834
  %8176 = vmatpush2.msra.mxu0 %v7831
  %8177 = vmatprep.subr.mxu0 %v7786
  %8178 = vmatpush2.msra.mxu0 %v7785
  %8179 = vmatprep.subr.mxu0 %v7773
  %8180 = vmatpush2.msra.mxu0 %v7772
  %8181 = vmatprep.subr.mxu0 %v7760
  %8182 = vmatpush2.msra.mxu0 %v7759
  %8183 = vmatprep.subr.mxu0 %v7747
  %8184 = vmatpush2.msra.mxu0 %v7746
  %8185 = vmatprep.subr.mxu0 %v7734
  %8186 = vmatpush2.msra.mxu0 %v7733
  %8187 = vmatprep.subr.mxu0 %v7721
  %8188 = vmatpush2.msra.mxu0 %v7720
  %8189 = vmatprep.subr.mxu0 %v7708
  %8190 = vmatpush2.msra.mxu0 %v7707
  %8191 = vmatprep.subr.mxu0 %v7695
  %8192 = vmatpush2.msra.mxu0 %v7694
  %8193 = vmatprep.mubr.f32.mxu0 %v7804
  %8194 = vmatmul.mubr.f32.gmra.mxu0 %v7475
  %v8195 = vpop.f32.mrf.mxu0
  %v8196 = vadd.f32 0.0, %v8195
  %v8197 = vpop.f32.mrf.mxu0
  %v8198 = vadd.f32 0.0, %v8197
  %8199 = vdwg.mxu0
  %8200 = vmatprep.subr.mxu0 %v7684
  %8201 = vmatpush1.msra.mxu0 %v7683
  %8202 = vmatprep.subr.mxu0 %v7671
  %8203 = vmatpush1.msra.mxu0 %v7670
  %8204 = vmatprep.subr.mxu0 %v7658
  %8205 = vmatpush1.msra.mxu0 %v7657
  %8206 = vmatprep.subr.mxu0 %v7645
  %8207 = vmatpush1.msra.mxu0 %v7644
  %8208 = vmatprep.subr.mxu0 %v7632
  %8209 = vmatpush1.msra.mxu0 %v7631
  %8210 = vmatprep.subr.mxu0 %v7619
  %8211 = vmatpush1.msra.mxu0 %v7618
  %8212 = vmatprep.subr.mxu0 %v7606
  %8213 = vmatpush1.msra.mxu0 %v7605
  %8214 = vmatprep.subr.mxu0 %v7593
  %8215 = vmatpush1.msra.mxu0 %v7592
  %8216 = vmatprep.subr.mxu0 %v7580
  %8217 = vmatpush1.msra.mxu0 %v7579
  %8218 = vmatprep.subr.mxu0 %v7567
  %8219 = vmatpush1.msra.mxu0 %v7566
  %8220 = vmatprep.subr.mxu0 %v7554
  %8221 = vmatpush1.msra.mxu0 %v7553
  %8222 = vmatprep.subr.mxu0 %v7541
  %8223 = vmatpush1.msra.mxu0 %v7540
  %8224 = vmatprep.subr.mxu0 %v7528
  %8225 = vmatpush1.msra.mxu0 %v7527
  %8226 = vmatprep.subr.mxu0 %v7515
  %8227 = vmatpush1.msra.mxu0 %v7514
  %8228 = vmatprep.subr.mxu0 %v7502
  %8229 = vmatpush1.msra.mxu0 %v7501
  %8230 = vmatprep.subr.mxu0 %v7489
  %8231 = vmatpush1.msra.mxu0 %v7488
  %8232 = vmatprep.subr.mxu0 0.0
  %8233 = vmatpush2.msra.mxu0 0.0
  %8234 = vmatprep.subr.mxu0 0.0
  %8235 = vmatpush2.msra.mxu0 0.0
  %8236 = vmatprep.subr.mxu0 0.0
  %8237 = vmatpush2.msra.mxu0 0.0
  %8238 = vmatprep.subr.mxu0 0.0
  %8239 = vmatpush2.msra.mxu0 0.0
  %8240 = vmatprep.subr.mxu0 0.0
  %8241 = vmatpush2.msra.mxu0 0.0
  %8242 = vmatprep.subr.mxu0 0.0
  %8243 = vmatpush2.msra.mxu0 0.0
  %8244 = vmatprep.subr.mxu0 0.0
  %8245 = vmatpush2.msra.mxu0 0.0
  %8246 = vmatprep.subr.mxu0 %v7840
  %8247 = vmatpush2.msra.mxu0 %v7837
  %8248 = vmatprep.subr.mxu0 %v7788
  %8249 = vmatpush2.msra.mxu0 %v7787
  %8250 = vmatprep.subr.mxu0 %v7775
  %8251 = vmatpush2.msra.mxu0 %v7774
  %8252 = vmatprep.subr.mxu0 %v7762
  %8253 = vmatpush2.msra.mxu0 %v7761
  %8254 = vmatprep.subr.mxu0 %v7749
  %8255 = vmatpush2.msra.mxu0 %v7748
  %8256 = vmatprep.subr.mxu0 %v7736
  %8257 = vmatpush2.msra.mxu0 %v7735
  %8258 = vmatprep.subr.mxu0 %v7723
  %8259 = vmatpush2.msra.mxu0 %v7722
  %8260 = vmatprep.subr.mxu0 %v7710
  %8261 = vmatpush2.msra.mxu0 %v7709
  %8262 = vmatprep.subr.mxu0 %v7697
  %8263 = vmatpush2.msra.mxu0 %v7696
  %8264 = vmatprep.mubr.f32.mxu0 %v7804
  %8265 = vmatmul.mubr.f32.gmra.mxu0 %v7475
  %v8266 = vpop.f32.mrf.mxu0
  %v8267 = vadd.f32 0.0, %v8266
  %v8268 = vpop.f32.mrf.mxu0
  %v8269 = vadd.f32 0.0, %v8268
  %8270 = vdwg.mxu0
  %8271 = vmatprep.subr.mxu0 0.0
  %8272 = vmatpush1.msra.mxu0 %v7685
  %8273 = vmatprep.subr.mxu0 0.0
  %8274 = vmatpush1.msra.mxu0 %v7672
  %8275 = vmatprep.subr.mxu0 0.0
  %8276 = vmatpush1.msra.mxu0 %v7659
  %8277 = vmatprep.subr.mxu0 0.0
  %8278 = vmatpush1.msra.mxu0 %v7646
  %8279 = vmatprep.subr.mxu0 0.0
  %8280 = vmatpush1.msra.mxu0 %v7633
  %8281 = vmatprep.subr.mxu0 0.0
  %8282 = vmatpush1.msra.mxu0 %v7620
  %8283 = vmatprep.subr.mxu0 0.0
  %8284 = vmatpush1.msra.mxu0 %v7607
  %8285 = vmatprep.subr.mxu0 0.0
  %8286 = vmatpush1.msra.mxu0 %v7594
  %8287 = vmatprep.subr.mxu0 0.0
  %8288 = vmatpush1.msra.mxu0 %v7581
  %8289 = vmatprep.subr.mxu0 0.0
  %8290 = vmatpush1.msra.mxu0 %v7568
  %8291 = vmatprep.subr.mxu0 0.0
  %8292 = vmatpush1.msra.mxu0 %v7555
  %8293 = vmatprep.subr.mxu0 0.0
  %8294 = vmatpush1.msra.mxu0 %v7542
  %8295 = vmatprep.subr.mxu0 0.0
  %8296 = vmatpush1.msra.mxu0 %v7529
  %8297 = vmatprep.subr.mxu0 0.0
  %8298 = vmatpush1.msra.mxu0 %v7516
  %8299 = vmatprep.subr.mxu0 0.0
  %8300 = vmatpush1.msra.mxu0 %v7503
  %8301 = vmatprep.subr.mxu0 0.0
  %8302 = vmatpush1.msra.mxu0 %v7490
  %8303 = vmatprep.subr.mxu0 0.0
  %8304 = vmatpush2.msra.mxu0 0.0
  %8305 = vmatprep.subr.mxu0 0.0
  %8306 = vmatpush2.msra.mxu0 0.0
  %8307 = vmatprep.subr.mxu0 0.0
  %8308 = vmatpush2.msra.mxu0 0.0
  %8309 = vmatprep.subr.mxu0 0.0
  %8310 = vmatpush2.msra.mxu0 0.0
  %8311 = vmatprep.subr.mxu0 0.0
  %8312 = vmatpush2.msra.mxu0 0.0
  %8313 = vmatprep.subr.mxu0 0.0
  %8314 = vmatpush2.msra.mxu0 0.0
  %8315 = vmatprep.subr.mxu0 0.0
  %8316 = vmatpush2.msra.mxu0 0.0
  %8317 = vmatprep.subr.mxu0 0.0
  %8318 = vmatpush2.msra.mxu0 %v7843
  %8319 = vmatprep.subr.mxu0 0.0
  %8320 = vmatpush2.msra.mxu0 %v7789
  %8321 = vmatprep.subr.mxu0 0.0
  %8322 = vmatpush2.msra.mxu0 %v7776
  %8323 = vmatprep.subr.mxu0 0.0
  %8324 = vmatpush2.msra.mxu0 %v7763
  %8325 = vmatprep.subr.mxu0 0.0
  %8326 = vmatpush2.msra.mxu0 %v7750
  %8327 = vmatprep.subr.mxu0 0.0
  %8328 = vmatpush2.msra.mxu0 %v7737
  %8329 = vmatprep.subr.mxu0 0.0
  %8330 = vmatpush2.msra.mxu0 %v7724
  %8331 = vmatprep.subr.mxu0 0.0
  %8332 = vmatpush2.msra.mxu0 %v7711
  %8333 = vmatprep.subr.mxu0 0.0
  %8334 = vmatpush2.msra.mxu0 %v7698
  %8335 = vmatprep.mubr.f32.mxu0 %v7804
  %8336 = vmatmul.mubr.f32.gmra.mxu0 %v7475
  %v8337 = vpop.f32.mrf.mxu0
  %v8338 = vadd.f32 0.0, %v8337
  %v8339 = vpop.f32.mrf.mxu0
  %8340 = vdwg.mxu0
  %v8341 = vadd.f32 %v7006, %v7912
  %v8342 = vadd.f32 %v7008, %v7914
  %v8343 = vadd.f32 %v7077, %v7983
  %v8344 = vadd.f32 %v7079, %v7985
  %v8345 = vadd.f32 %v7148, %v8054
  %v8346 = vadd.f32 %v7150, %v8056
  %v8347 = vadd.f32 %v7219, %v8125
  %v8348 = vadd.f32 %v7221, %v8127
  %v8349 = vadd.f32 %v7290, %v8196
  %v8350 = vadd.f32 %v7292, %v8198
  %v8351 = vadd.f32 %v7361, %v8267
  %v8352 = vadd.f32 %v7363, %v8269
  %v8353 = vadd.f32 %v7432, %v8338
  %v8354 = vrot.slane %v914, 3
  %v8355 = vrot.slane %v916, 3
  %v8358 = vrot.slane %v1583, 2
  %v8359 = vrot.slane %v1585, 2
  %v8362 = vrot.slane %v2252, 1
  %v8363 = vrot.slane %v2254, 1
  %v8366 = vrot.slane %v3590, 7
  %v8367 = vrot.slane %v3592, 7
  %v8370 = vrot.slane %v4259, 6
  %v8371 = vrot.slane %v4261, 6
  %v8374 = vrot.slane %v4928, 5
  %v8375 = vrot.slane %v4930, 5
  %v8378 = vrot.slane %v5597, 4
  %v8379 = vrot.slane %v5599, 4
  %v8382 = vsel %vm5643, %v8354, %v8358
  %v8383 = vsel %vm5643, %v8355, %v8359
  %v8384 = vsel %vm5646, %v8382, %v8362
  %v8385 = vsel %vm5646, %v8383, %v8363
  %v8386 = vsel %vm318, %v8384, %v2921
  %v8387 = vsel %vm318, %v8385, %v2923
  %v8388 = vsel %vm5651, %v8386, %v8366
  %v8389 = vsel %vm5651, %v8387, %v8367
  %v8390 = vsel %vm5654, %v8388, %v8370
  %v8391 = vsel %vm5654, %v8389, %v8371
  %v8392 = vsel %vm5657, %v8390, %v8374
  %v8393 = vsel %vm5657, %v8391, %v8375
  %v8394 = vsel %vm5660, %v8392, %v8378
  %v8395 = vsel %vm5660, %v8393, %v8379
  %s8396 = scalar_lea.vmem %s4, 7800
  %v8397 = vld [vmem:[%s8396] sm:$0xff]
  %v8398 = vld [vmem:[%s8396 + $0x8] sm:$0xff]
  %v8399 = vld [vmem:[%s8396 + $0x10] sm:$0xff]
  %v8400 = vld [vmem:[%s8396 + $0x18] sm:$0xff]
  %v8401 = vld [vmem:[%s8396 + $0x20] sm:$0xff]
  %v8402 = vld [vmem:[%s8396 + $0x28] sm:$0xff]
  %v8403 = vld [vmem:[%s8396 + $0x30] sm:$0xff]
  %v8404 = vld [vmem:[%s8396 + $0x38] sm:$0xff]
  %v8405 = vld [vmem:[%s8396 + $0x40] sm:$0xff]
  %v8406 = vld [vmem:[%s8396 + $0x48] sm:$0xff]
  %v8407 = vld [vmem:[%s8396 + $0x50] sm:$0xff]
  %v8408 = vld [vmem:[%s8396 + $0x58] sm:$0xff]
  %v8409 = vld [vmem:[%s8396 + $0x60] sm:$0xff]
  %v8410 = vld [vmem:[%s8396 + $0x68] sm:$0xff]
  %v8411 = vld [vmem:[%s8396 + $0x70] sm:$0xff]
  %v8412 = vld [vmem:[%s8396 + $0x78] sm:$0xff]
  %v8413 = vld [vmem:[%s8396 + $0x80] sm:$0xff]
  %v8414 = vld [vmem:[%s8396 + $0x88] sm:$0xff]
  %v8415 = vld [vmem:[%s8396 + $0x90] sm:$0xff]
  %v8416 = vld [vmem:[%s8396 + $0x98] sm:$0xff]
  %v8417 = vld [vmem:[%s8396 + $0xa0] sm:$0xff]
  %v8418 = vld [vmem:[%s8396 + $0xa8] sm:$0xff]
  %v8419 = vld [vmem:[%s8396 + $0xb0] sm:$0xff]
  %v8420 = vld [vmem:[%s8396 + $0xb8] sm:$0xff]
  %v8421 = vld [vmem:[%s8396 + $0xc0] sm:$0xff]
  %v8422 = vld [vmem:[%s8396 + $0xc8] sm:$0xff]
  %v8423 = vld [vmem:[%s8396 + $0xd0] sm:$0xff]
  %v8424 = vld [vmem:[%s8396 + $0xd8] sm:$0xff]
  %v8425 = vld [vmem:[%s8396 + $0xe0] sm:$0xff]
  %v8426 = vld [vmem:[%s8396 + $0xe8] sm:$0xff]
  %v8427 = vld [vmem:[%s8396 + $0xf0] sm:$0xff]
  %v8428 = vld [vmem:[%s8396 + $0xf8] sm:$0xff]
  %v8429 = vld [vmem:[%s8396 + $0x100] sm:$0xff]
  %v8430 = vld [vmem:[%s8396 + $0x108] sm:$0xff]
  %v8431 = vld [vmem:[%s8396 + $0x110] sm:$0xff]
  %v8432 = vld [vmem:[%s8396 + $0x118] sm:$0xff]
  %v8433 = vld [vmem:[%s8396 + $0x120] sm:$0xff]
  %v8434 = vld [vmem:[%s8396 + $0x128] sm:$0xff]
  %v8435 = vld [vmem:[%s8396 + $0x130] sm:$0xff]
  %v8436 = vld [vmem:[%s8396 + $0x138] sm:$0xff]
  %v8437 = vld [vmem:[%s8396 + $0x140] sm:$0xff]
  %v8438 = vld [vmem:[%s8396 + $0x148] sm:$0xff]
  %v8439 = vld [vmem:[%s8396 + $0x150] sm:$0xff]
  %v8440 = vld [vmem:[%s8396 + $0x158] sm:$0xff]
  %v8441 = vld [vmem:[%s8396 + $0x160] sm:$0xff]
  %v8442 = vld [vmem:[%s8396 + $0x168] sm:$0xff]
  %v8443 = vld [vmem:[%s8396 + $0x170] sm:$0xff]
  %v8444 = vld [vmem:[%s8396 + $0x178] sm:$0xff]
  %v8445 = vld [vmem:[%s8396 + $0x180] sm:$0xff]
  %v8446 = vld [vmem:[%s8396 + $0x188] sm:$0xff]
  %v8447 = vld [vmem:[%s8396 + $0x190] sm:$0xff]
  %v8448 = vld [vmem:[%s8396 + $0x198] sm:$0xff]
  %v8449 = vld [vmem:[%s8396 + $0x1a0] sm:$0xff]
  %v8450 = vld [vmem:[%s8396 + $0x1a8] sm:$0xff]
  %v8451 = vld [vmem:[%s8396 + $0x1b0] sm:$0xff]
  %v8452 = vld [vmem:[%s8396 + $0x1b8] sm:$0xff]
  %v8453 = vld [vmem:[%s8396 + $0x1c0] sm:$0xff]
  %v8454 = vld [vmem:[%s8396 + $0x1c8] sm:$0xff]
  %v8455 = vld [vmem:[%s8396 + $0x1d0] sm:$0xff]
  %v8456 = vld [vmem:[%s8396 + $0x1d8] sm:$0xff]
  %v8457 = vld [vmem:[%s8396 + $0x1e0] sm:$0xff]
  %v8458 = vld [vmem:[%s8396 + $0x1e8] sm:$0xff]
  %v8459 = vld [vmem:[%s8396 + $0x1f0] sm:$0xff]
  %v8460 = vld [vmem:[%s8396 + $0x1f8] sm:$0xff]
  %v8461 = vld [vmem:[%s8396 + $0x200] sm:$0xff]
  %v8462 = vld [vmem:[%s8396 + $0x208] sm:$0xff]
  %v8463 = vld [vmem:[%s8396 + $0x210] sm:$0xff]
  %v8464 = vld [vmem:[%s8396 + $0x218] sm:$0xff]
  %v8465 = vld [vmem:[%s8396 + $0x220] sm:$0xff]
  %v8466 = vld [vmem:[%s8396 + $0x228] sm:$0xff]
  %v8467 = vld [vmem:[%s8396 + $0x230] sm:$0xff]
  %v8468 = vld [vmem:[%s8396 + $0x238] sm:$0xff]
  %v8469 = vld [vmem:[%s8396 + $0x240] sm:$0xff]
  %v8470 = vld [vmem:[%s8396 + $0x248] sm:$0xff]
  %v8471 = vld [vmem:[%s8396 + $0x250] sm:$0xff]
  %v8472 = vld [vmem:[%s8396 + $0x258] sm:$0xff]
  %v8473 = vld [vmem:[%s8396 + $0x260] sm:$0xff]
  %v8474 = vld [vmem:[%s8396 + $0x268] sm:$0xff]
  %v8475 = vld [vmem:[%s8396 + $0x270] sm:$0xff]
  %v8476 = vld [vmem:[%s8396 + $0x278] sm:$0xff]
  %v8477 = vld [vmem:[%s8396 + $0x280] sm:$0xff]
  %v8478 = vld [vmem:[%s8396 + $0x288] sm:$0xff]
  %v8479 = vld [vmem:[%s8396 + $0x290] sm:$0xff]
  %v8480 = vld [vmem:[%s8396 + $0x298] sm:$0xff]
  %v8481 = vld [vmem:[%s8396 + $0x2a0] sm:$0xff]
  %v8482 = vld [vmem:[%s8396 + $0x2a8] sm:$0xff]
  %v8483 = vld [vmem:[%s8396 + $0x2b0] sm:$0xff]
  %v8484 = vld [vmem:[%s8396 + $0x2b8] sm:$0xff]
  %v8485 = vld [vmem:[%s8396 + $0x2c0] sm:$0xff]
  %v8486 = vld [vmem:[%s8396 + $0x2c8] sm:$0xff]
  %v8487 = vld [vmem:[%s8396 + $0x2d0] sm:$0xff]
  %v8488 = vld [vmem:[%s8396 + $0x2d8] sm:$0xff]
  %v8489 = vld [vmem:[%s8396 + $0x2e0] sm:$0xff]
  %v8490 = vld [vmem:[%s8396 + $0x2e8] sm:$0xff]
  %v8491 = vld [vmem:[%s8396 + $0x2f0] sm:$0xff]
  %v8492 = vld [vmem:[%s8396 + $0x2f8] sm:$0xff]
  %v8493 = vld [vmem:[%s8396 + $0x300] sm:$0xff]
  %v8494 = vld [vmem:[%s8396 + $0x308] sm:$0xff]
  %v8495 = vld [vmem:[%s8396 + $0x310] sm:$0xff]
  %v8496 = vld [vmem:[%s8396 + $0x318] sm:$0xff]
  %v8497 = vld [vmem:[%s8396 + $0x320] sm:$0xff]
  %v8498 = vld [vmem:[%s8396 + $0x328] sm:$0xff]
  %v8499 = vld [vmem:[%s8396 + $0x330] sm:$0xff]
  %v8500 = vld [vmem:[%s8396 + $0x338] sm:$0xff]
  %v8501 = vld [vmem:[%s8396 + $0x340] sm:$0xff]
  %v8502 = vld [vmem:[%s8396 + $0x348] sm:$0xff]
  %v8503 = vld [vmem:[%s8396 + $0x350] sm:$0xff]
  %v8504 = vld [vmem:[%s8396 + $0x358] sm:$0xff]
  %v8505 = vld [vmem:[%s8396 + $0x360] sm:$0xff]
  %v8506 = vld [vmem:[%s8396 + $0x368] sm:$0xff]
  %v8507 = vld [vmem:[%s8396 + $0x370] sm:$0xff]
  %v8508 = vld [vmem:[%s8396 + $0x378] sm:$0xff]
  %v8509 = vld [vmem:[%s8396 + $0x380] sm:$0xff]
  %v8510 = vld [vmem:[%s8396 + $0x388] sm:$0xff]
  %v8511 = vld [vmem:[%s8396 + $0x390] sm:$0xff]
  %v8512 = vld [vmem:[%s8396 + $0x398] sm:$0xff]
  %v8513 = vld [vmem:[%s8396 + $0x3a0] sm:$0xff]
  %v8514 = vld [vmem:[%s8396 + $0x3a8] sm:$0xff]
  %v8515 = vld [vmem:[%s8396 + $0x3b0] sm:$0xff]
  %v8516 = vld [vmem:[%s8396 + $0x3b8] sm:$0xff]
  %v8517 = vld [vmem:[%s8396 + $0x3c0] sm:$0xff]
  %v8518 = vld [vmem:[%s8396 + $0x3c8] sm:$0xff]
  %v8519 = vld [vmem:[%s8396 + $0x3d0] sm:$0xff]
  %v8520 = vld [vmem:[%s8396 + $0x3d8] sm:$0xff]
  %v8521 = vld [vmem:[%s8396 + $0x3e0] sm:$0xff]
  %v8522 = vld [vmem:[%s8396 + $0x3e8] sm:$0xff]
  %v8523 = vld [vmem:[%s8396 + $0x3f0] sm:$0xff]
  %v8524 = vld [vmem:[%s8396 + $0x3f8] sm:$0xff]
  %v8525 = vld [vmem:[%s8396 + $0x400] sm:$0xff]
  %v8526 = vld [vmem:[%s8396 + $0x408] sm:$0xff]
  %v8527 = vld [vmem:[%s8396 + $0x410] sm:$0xff]
  %v8528 = vld [vmem:[%s8396 + $0x418] sm:$0xff]
  %v8529 = vld [vmem:[%s8396 + $0x420] sm:$0xff]
  %v8530 = vld [vmem:[%s8396 + $0x428] sm:$0xff]
  %v8531 = vld [vmem:[%s8396 + $0x430] sm:$0xff]
  %v8532 = vld [vmem:[%s8396 + $0x438] sm:$0xff]
  %v8533 = vld [vmem:[%s8396 + $0x440] sm:$0xff]
  %v8534 = vld [vmem:[%s8396 + $0x448] sm:$0xff]
  %v8535 = vld [vmem:[%s8396 + $0x450] sm:$0xff]
  %v8536 = vld [vmem:[%s8396 + $0x458] sm:$0xff]
  %v8537 = vld [vmem:[%s8396 + $0x460] sm:$0xff]
  %v8538 = vld [vmem:[%s8396 + $0x468] sm:$0xff]
  %v8539 = vld [vmem:[%s8396 + $0x470] sm:$0xff]
  %v8540 = vld [vmem:[%s8396 + $0x478] sm:$0xff]
  %v8541 = vld [vmem:[%s8396 + $0x480] sm:$0xff]
  %v8542 = vld [vmem:[%s8396 + $0x488] sm:$0xff]
  %v8543 = vld [vmem:[%s8396 + $0x490] sm:$0xff]
  %v8544 = vld [vmem:[%s8396 + $0x498] sm:$0xff]
  %v8545 = vld [vmem:[%s8396 + $0x4a0] sm:$0xff]
  %v8546 = vld [vmem:[%s8396 + $0x4a8] sm:$0xff]
  %v8547 = vld [vmem:[%s8396 + $0x4b0] sm:$0xff]
  %v8548 = vld [vmem:[%s8396 + $0x4b8] sm:$0xff]
  %v8549 = vld [vmem:[%s8396 + $0x4c0] sm:$0xff]
  %v8550 = vld [vmem:[%s8396 + $0x4c8] sm:$0xff]
  %v8551 = vld [vmem:[%s8396 + $0x4d0] sm:$0xff]
  %v8552 = vld [vmem:[%s8396 + $0x4d8] sm:$0xff]
  %v8553 = vld [vmem:[%s8396 + $0x4e0] sm:$0xff]
  %v8554 = vld [vmem:[%s8396 + $0x4e8] sm:$0xff]
  %v8555 = vld [vmem:[%s8396 + $0x4f0] sm:$0xff]
  %v8556 = vld [vmem:[%s8396 + $0x4f8] sm:$0xff]
  %v8557 = vld [vmem:[%s8396 + $0x500] sm:$0xff]
  %v8558 = vld [vmem:[%s8396 + $0x508] sm:$0xff]
  %v8559 = vld [vmem:[%s8396 + $0x510] sm:$0xff]
  %v8560 = vld [vmem:[%s8396 + $0x518] sm:$0xff]
  %v8561 = vld [vmem:[%s8396 + $0x520] sm:$0xff]
  %v8562 = vld [vmem:[%s8396 + $0x528] sm:$0xff]
  %v8563 = vld [vmem:[%s8396 + $0x530] sm:$0xff]
  %v8564 = vld [vmem:[%s8396 + $0x538] sm:$0xff]
  %v8565 = vld [vmem:[%s8396 + $0x540] sm:$0xff]
  %v8566 = vld [vmem:[%s8396 + $0x548] sm:$0xff]
  %v8567 = vld [vmem:[%s8396 + $0x550] sm:$0xff]
  %v8568 = vld [vmem:[%s8396 + $0x558] sm:$0xff]
  %v8569 = vld [vmem:[%s8396 + $0x560] sm:$0xff]
  %v8570 = vld [vmem:[%s8396 + $0x568] sm:$0xff]
  %v8571 = vld [vmem:[%s8396 + $0x570] sm:$0xff]
  %v8572 = vld [vmem:[%s8396 + $0x578] sm:$0xff]
  %v8573 = vld [vmem:[%s8396 + $0x580] sm:$0xff]
  %v8574 = vld [vmem:[%s8396 + $0x588] sm:$0xff]
  %v8575 = vld [vmem:[%s8396 + $0x590] sm:$0xff]
  %v8576 = vld [vmem:[%s8396 + $0x598] sm:$0xff]
  %v8577 = vld [vmem:[%s8396 + $0x5a0] sm:$0xff]
  %v8578 = vld [vmem:[%s8396 + $0x5a8] sm:$0xff]
  %v8579 = vld [vmem:[%s8396 + $0x5b0] sm:$0xff]
  %v8580 = vld [vmem:[%s8396 + $0x5b8] sm:$0xff]
  %v8581 = vld [vmem:[%s8396 + $0x5c0] sm:$0xff]
  %v8582 = vld [vmem:[%s8396 + $0x5c8] sm:$0xff]
  %v8583 = vld [vmem:[%s8396 + $0x5d0] sm:$0xff]
  %v8584 = vld [vmem:[%s8396 + $0x5d8] sm:$0xff]
  %v8585 = vld [vmem:[%s8396 + $0x5e0] sm:$0xff]
  %v8586 = vld [vmem:[%s8396 + $0x5e8] sm:$0xff]
  %v8587 = vld [vmem:[%s8396 + $0x5f0] sm:$0xff]
  %v8588 = vld [vmem:[%s8396 + $0x5f8] sm:$0xff]
  %v8589 = vld [vmem:[%s8396 + $0x600] sm:$0xff]
  %v8590 = vld [vmem:[%s8396 + $0x608] sm:$0xff]
  %v8591 = vld [vmem:[%s8396 + $0x610] sm:$0xff]
  %v8592 = vld [vmem:[%s8396 + $0x618] sm:$0xff]
  %v8593 = vld [vmem:[%s8396 + $0x620] sm:$0xff]
  %v8594 = vld [vmem:[%s8396 + $0x628] sm:$0xff]
  %v8595 = vld [vmem:[%s8396 + $0x630] sm:$0xff]
  %v8596 = vld [vmem:[%s8396 + $0x638] sm:$0xff]
  %v8597 = vld [vmem:[%s8396 + $0x640] sm:$0xff]
  %v8598 = vld [vmem:[%s8396 + $0x648] sm:$0xff]
  %v8599 = vld [vmem:[%s8396 + $0x650] sm:$0xff]
  %v8600 = vld [vmem:[%s8396 + $0x658] sm:$0xff]
  %v8601 = vld [vmem:[%s8396 + $0x660] sm:$0xff]
  %v8602 = vld [vmem:[%s8396 + $0x668] sm:$0xff]
  %v8603 = vld [vmem:[%s8396 + $0x670] sm:$0xff]
  %v8604 = vld [vmem:[%s8396 + $0x678] sm:$0xff]
  %v8605 = vld [vmem:[%s8396 + $0x680] sm:$0xff]
  %v8606 = vld [vmem:[%s8396 + $0x688] sm:$0xff]
  %v8607 = vld [vmem:[%s8396 + $0x690] sm:$0xff]
  %v8608 = vld [vmem:[%s8396 + $0x698] sm:$0xff]
  %v8609 = vld [vmem:[%s8396 + $0x6a0] sm:$0xff]
  %v8610 = vld [vmem:[%s8396 + $0x6a8] sm:$0xff]
  %v8611 = vld [vmem:[%s8396 + $0x6b0] sm:$0xff]
  %v8612 = vld [vmem:[%s8396 + $0x6b8] sm:$0xff]
  %v8613 = vld [vmem:[%s8396 + $0x6c0] sm:$0xff]
  %v8614 = vld [vmem:[%s8396 + $0x6c8] sm:$0xff]
  %v8615 = vld [vmem:[%s8396 + $0x6d0] sm:$0xff]
  %v8616 = vld [vmem:[%s8396 + $0x6d8] sm:$0xff]
  %v8617 = vld [vmem:[%s8396 + $0x6e0] sm:$0xff]
  %v8618 = vld [vmem:[%s8396 + $0x6e8] sm:$0xff]
  %v8619 = vld [vmem:[%s8396 + $0x6f0] sm:$0xff]
  %v8620 = vld [vmem:[%s8396 + $0x6f8] sm:$0xff]
  %v8621 = vld [vmem:[%s8396 + $0x700] sm:$0xff]
  %v8622 = vld [vmem:[%s8396 + $0x708] sm:$0xff]
  %v8623 = vld [vmem:[%s8396 + $0x710] sm:$0xff]
  %v8624 = vld [vmem:[%s8396 + $0x718] sm:$0xff]
  %v8625 = vld [vmem:[%s8396 + $0x720] sm:$0xff]
  %v8626 = vld [vmem:[%s8396 + $0x728] sm:$0xff]
  %v8627 = vld [vmem:[%s8396 + $0x730] sm:$0xff]
  %v8628 = vld [vmem:[%s8396 + $0x738] sm:$0xff]
  %v8629 = vld [vmem:[%s8396 + $0x740] sm:$0xff]
  %v8630 = vld [vmem:[%s8396 + $0x748] sm:$0xff]
  %v8631 = vld [vmem:[%s8396 + $0x750] sm:$0xff]
  %v8632 = vld [vmem:[%s8396 + $0x758] sm:$0xff]
  %v8633 = vld [vmem:[%s8396 + $0x760] sm:$0xff]
  %v8634 = vld [vmem:[%s8396 + $0x768] sm:$0xff]
  %v8635 = vld [vmem:[%s8396 + $0x770] sm:$0xff]
  %v8636 = vld [vmem:[%s8396 + $0x778] sm:$0xff]
  %v8637 = vld [vmem:[%s8396 + $0x780] sm:$0xff]
  %v8638 = vld [vmem:[%s8396 + $0x788] sm:$0xff]
  %v8639 = vld [vmem:[%s8396 + $0x790] sm:$0xff]
  %v8640 = vld [vmem:[%s8396 + $0x798] sm:$0xff]
  %v8641 = vld [vmem:[%s8396 + $0x7a0] sm:$0xff]
  %v8642 = vld [vmem:[%s8396 + $0x7a8] sm:$0xff]
  %v8643 = vld [vmem:[%s8396 + $0x7b0] sm:$0xff]
  %v8644 = vld [vmem:[%s8396 + $0x7b8] sm:$0xff]
  %v8645 = vld [vmem:[%s8396 + $0x7c0] sm:$0xff]
  %v8646 = vld [vmem:[%s8396 + $0x7c8] sm:$0xff]
  %v8647 = vld [vmem:[%s8396 + $0x7d0] sm:$0xff]
  %v8648 = vld [vmem:[%s8396 + $0x7d8] sm:$0xff]
  %v8649 = vld [vmem:[%s8396 + $0x7e0] sm:$0xff]
  %v8650 = vld [vmem:[%s8396 + $0x7e8] sm:$0xff]
  %v8651 = vld [vmem:[%s8396 + $0x7f0] sm:$0xff]
  %v8652 = vld [vmem:[%s8396 + $0x7f8] sm:$0xff]
  %v8653 = vld [vmem:[%s8396 + $0x800] sm:$0xff]
  %v8654 = vld [vmem:[%s8396 + $0x808] sm:$0xff]
  %v8655 = vld [vmem:[%s8396 + $0x810] sm:$0xff]
  %v8656 = vld [vmem:[%s8396 + $0x818] sm:$0xff]
  %v8657 = vld [vmem:[%s8396 + $0x820] sm:$0xff]
  %v8658 = vld [vmem:[%s8396 + $0x828] sm:$0xff]
  %v8659 = vld [vmem:[%s8396 + $0x830] sm:$0xff]
  %v8660 = vld [vmem:[%s8396 + $0x838] sm:$0xff]
  %v8661 = vld [vmem:[%s8396 + $0x840] sm:$0xff]
  %v8662 = vld [vmem:[%s8396 + $0x848] sm:$0xff]
  %v8663 = vld [vmem:[%s8396 + $0x850] sm:$0xff]
  %v8664 = vld [vmem:[%s8396 + $0x858] sm:$0xff]
  %v8665 = vld [vmem:[%s8396 + $0x860] sm:$0xff]
  %v8666 = vld [vmem:[%s8396 + $0x868] sm:$0xff]
  %v8667 = vld [vmem:[%s8396 + $0x870] sm:$0xff]
  %v8668 = vld [vmem:[%s8396 + $0x878] sm:$0xff]
  %v8669 = vld [vmem:[%s8396 + $0x880] sm:$0xff]
  %v8670 = vld [vmem:[%s8396 + $0x888] sm:$0xff]
  %v8671 = vld [vmem:[%s8396 + $0x890] sm:$0xff]
  %v8672 = vld [vmem:[%s8396 + $0x898] sm:$0xff]
  %v8673 = vld [vmem:[%s8396 + $0x8a0] sm:$0xff]
  %v8674 = vld [vmem:[%s8396 + $0x8a8] sm:$0xff]
  %v8675 = vld [vmem:[%s8396 + $0x8b0] sm:$0xff]
  %v8676 = vld [vmem:[%s8396 + $0x8b8] sm:$0xff]
  %v8677 = vld [vmem:[%s8396 + $0x8c0] sm:$0xff]
  %v8678 = vld [vmem:[%s8396 + $0x8c8] sm:$0xff]
  %v8679 = vld [vmem:[%s8396 + $0x8d0] sm:$0xff]
  %v8680 = vld [vmem:[%s8396 + $0x8d8] sm:$0xff]
  %v8681 = vld [vmem:[%s8396 + $0x8e0] sm:$0xff]
  %v8682 = vld [vmem:[%s8396 + $0x8e8] sm:$0xff]
  %v8683 = vld [vmem:[%s8396 + $0x8f0] sm:$0xff]
  %v8684 = vld [vmem:[%s8396 + $0x8f8] sm:$0xff]
  %v8685 = vld [vmem:[%s8396 + $0x900] sm:$0xff]
  %v8686 = vld [vmem:[%s8396 + $0x908] sm:$0xff]
  %v8687 = vld [vmem:[%s8396 + $0x910] sm:$0xff]
  %v8688 = vld [vmem:[%s8396 + $0x918] sm:$0xff]
  %v8689 = vld [vmem:[%s8396 + $0x920] sm:$0xff]
  %v8690 = vld [vmem:[%s8396 + $0x928] sm:$0xff]
  %v8691 = vld [vmem:[%s8396 + $0x930] sm:$0xff]
  %v8692 = vld [vmem:[%s8396 + $0x938] sm:$0xff]
  %v8693 = vld [vmem:[%s8396 + $0x940] sm:$0xff]
  %v8694 = vld [vmem:[%s8396 + $0x948] sm:$0xff]
  %v8695 = vld [vmem:[%s8396 + $0x950] sm:$0xff]
  %v8696 = vld [vmem:[%s8396 + $0x958] sm:$0xff]
  %v8697 = vld [vmem:[%s8396 + $0x960] sm:$0xff]
  %v8698 = vld [vmem:[%s8396 + $0x968] sm:$0xff]
  %v8699 = vld [vmem:[%s8396 + $0x970] sm:$0xff]
  %v8700 = vld [vmem:[%s8396 + $0x978] sm:$0xff]
  %v8701 = vld [vmem:[%s8396 + $0x980] sm:$0xff]
  %v8702 = vld [vmem:[%s8396 + $0x988] sm:$0xff]
  %v8703 = vld [vmem:[%s8396 + $0x990] sm:$0xff]
  %v8704 = vld [vmem:[%s8396 + $0x998] sm:$0xff]
  %v8705 = vld [vmem:[%s8396 + $0x9a0] sm:$0xff]
  %v8706 = vld [vmem:[%s8396 + $0x9a8] sm:$0xff]
  %v8707 = vld [vmem:[%s8396 + $0x9b0] sm:$0xff]
  %v8708 = vld [vmem:[%s8396 + $0x9b8] sm:$0xff]
  %v8709 = vld [vmem:[%s8396 + $0x9c0] sm:$0xf]
  %v8710 = vld [vmem:[%s8396 + $0x9c8] sm:$0xf]
  %v8711 = vld [vmem:[%s8396 + $0x9d0] sm:$0xf]
  %v8712 = vld [vmem:[%s8396 + $0x9d8] sm:$0xf]
  %v8713 = vld [vmem:[%s8396 + $0x9e0] sm:$0xf]
  %v8714 = vld [vmem:[%s8396 + $0x9e8] sm:$0xf]
  %v8715 = vld [vmem:[%s8396 + $0x9f0] sm:$0xf]
  %v8716 = vld [vmem:[%s8396 + $0x9f8] sm:$0xf]
  %v8717 = vld [vmem:[%s8396 + $0xa00] sm:$0xf]
  %v8718 = vld [vmem:[%s8396 + $0xa08] sm:$0xf]
  %v8719 = vld [vmem:[%s8396 + $0xa10] sm:$0xf]
  %v8720 = vld [vmem:[%s8396 + $0xa18] sm:$0xf]
  %v8721 = vld [vmem:[%s8396 + $0xa20] sm:$0xf]
  %v8723 = vsel %vm6358, %v8395, 0
  %v8726 = vsel %vm5651, %v8709, 0
  %v8729 = vsel %vm5651, %v8710, 0
  %v8732 = vsel %vm5651, %v8711, 0
  %v8735 = vsel %vm5651, %v8712, 0
  %v8738 = vsel %vm5651, %v8713, 0
  %v8741 = vsel %vm5651, %v8714, 0
  %v8744 = vsel %vm5651, %v8715, 0
  %v8747 = vsel %vm5651, %v8716, 0
  %v8750 = vsel %vm5651, %v8717, 0
  %v8753 = vsel %vm5651, %v8718, 0
  %v8756 = vsel %vm5651, %v8719, 0
  %v8759 = vsel %vm5651, %v8720, 0
  %v8762 = vsel %vm5651, %v8721, 0
  %8764 = vmatprep.subr.mxu0 %v8593
  %8765 = vmatpush1.msra.mxu0 %v8592
  %8766 = vmatprep.subr.mxu0 %v8580
  %8767 = vmatpush1.msra.mxu0 %v8579
  %8768 = vmatprep.subr.mxu0 %v8567
  %8769 = vmatpush1.msra.mxu0 %v8566
  %8770 = vmatprep.subr.mxu0 %v8554
  %8771 = vmatpush1.msra.mxu0 %v8553
  %8772 = vmatprep.subr.mxu0 %v8541
  %8773 = vmatpush1.msra.mxu0 %v8540
  %8774 = vmatprep.subr.mxu0 %v8528
  %8775 = vmatpush1.msra.mxu0 %v8527
  %8776 = vmatprep.subr.mxu0 %v8515
  %8777 = vmatpush1.msra.mxu0 %v8514
  %8778 = vmatprep.subr.mxu0 %v8502
  %8779 = vmatpush1.msra.mxu0 %v8501
  %8780 = vmatprep.subr.mxu0 %v8489
  %8781 = vmatpush1.msra.mxu0 %v8488
  %8782 = vmatprep.subr.mxu0 %v8476
  %8783 = vmatpush1.msra.mxu0 %v8475
  %8784 = vmatprep.subr.mxu0 %v8463
  %8785 = vmatpush1.msra.mxu0 %v8462
  %8786 = vmatprep.subr.mxu0 %v8450
  %8787 = vmatpush1.msra.mxu0 %v8449
  %8788 = vmatprep.subr.mxu0 %v8437
  %8789 = vmatpush1.msra.mxu0 %v8436
  %8790 = vmatprep.subr.mxu0 %v8424
  %8791 = vmatpush1.msra.mxu0 %v8423
  %8792 = vmatprep.subr.mxu0 %v8411
  %8793 = vmatpush1.msra.mxu0 %v8410
  %8794 = vmatprep.subr.mxu0 %v8398
  %8795 = vmatpush1.msra.mxu0 %v8397
  %8796 = vmatprep.subr.mxu0 0.0
  %8797 = vmatpush2.msra.mxu0 0.0
  %8798 = vmatprep.subr.mxu0 0.0
  %8799 = vmatpush2.msra.mxu0 0.0
  %8800 = vmatprep.subr.mxu0 0.0
  %8801 = vmatpush2.msra.mxu0 0.0
  %8802 = vmatprep.subr.mxu0 0.0
  %8803 = vmatpush2.msra.mxu0 0.0
  %8804 = vmatprep.subr.mxu0 0.0
  %8805 = vmatpush2.msra.mxu0 0.0
  %8806 = vmatprep.subr.mxu0 0.0
  %8807 = vmatpush2.msra.mxu0 0.0
  %8808 = vmatprep.subr.mxu0 0.0
  %8809 = vmatpush2.msra.mxu0 0.0
  %8810 = vmatprep.subr.mxu0 %v8729
  %8811 = vmatpush2.msra.mxu0 %v8726
  %8812 = vmatprep.subr.mxu0 %v8697
  %8813 = vmatpush2.msra.mxu0 %v8696
  %8814 = vmatprep.subr.mxu0 %v8684
  %8815 = vmatpush2.msra.mxu0 %v8683
  %8816 = vmatprep.subr.mxu0 %v8671
  %8817 = vmatpush2.msra.mxu0 %v8670
  %8818 = vmatprep.subr.mxu0 %v8658
  %8819 = vmatpush2.msra.mxu0 %v8657
  %8820 = vmatprep.subr.mxu0 %v8645
  %8821 = vmatpush2.msra.mxu0 %v8644
  %8822 = vmatprep.subr.mxu0 %v8632
  %8823 = vmatpush2.msra.mxu0 %v8631
  %8824 = vmatprep.subr.mxu0 %v8619
  %8825 = vmatpush2.msra.mxu0 %v8618
  %8826 = vmatprep.subr.mxu0 %v8606
  %8827 = vmatpush2.msra.mxu0 %v8605
  %8828 = vmatprep.mubr.f32.mxu0 %v8723
  %8829 = vmatmul.mubr.f32.gmra.mxu0 %v8394
  %v8830 = vpop.f32.mrf.mxu0
  %v8831 = vadd.f32 0.0, %v8830
  %v8832 = vpop.f32.mrf.mxu0
  %v8833 = vadd.f32 0.0, %v8832
  %8834 = vdwg.mxu0
  %8835 = vmatprep.subr.mxu0 %v8595
  %8836 = vmatpush1.msra.mxu0 %v8594
  %8837 = vmatprep.subr.mxu0 %v8582
  %8838 = vmatpush1.msra.mxu0 %v8581
  %8839 = vmatprep.subr.mxu0 %v8569
  %8840 = vmatpush1.msra.mxu0 %v8568
  %8841 = vmatprep.subr.mxu0 %v8556
  %8842 = vmatpush1.msra.mxu0 %v8555
  %8843 = vmatprep.subr.mxu0 %v8543
  %8844 = vmatpush1.msra.mxu0 %v8542
  %8845 = vmatprep.subr.mxu0 %v8530
  %8846 = vmatpush1.msra.mxu0 %v8529
  %8847 = vmatprep.subr.mxu0 %v8517
  %8848 = vmatpush1.msra.mxu0 %v8516
  %8849 = vmatprep.subr.mxu0 %v8504
  %8850 = vmatpush1.msra.mxu0 %v8503
  %8851 = vmatprep.subr.mxu0 %v8491
  %8852 = vmatpush1.msra.mxu0 %v8490
  %8853 = vmatprep.subr.mxu0 %v8478
  %8854 = vmatpush1.msra.mxu0 %v8477
  %8855 = vmatprep.subr.mxu0 %v8465
  %8856 = vmatpush1.msra.mxu0 %v8464
  %8857 = vmatprep.subr.mxu0 %v8452
  %8858 = vmatpush1.msra.mxu0 %v8451
  %8859 = vmatprep.subr.mxu0 %v8439
  %8860 = vmatpush1.msra.mxu0 %v8438
  %8861 = vmatprep.subr.mxu0 %v8426
  %8862 = vmatpush1.msra.mxu0 %v8425
  %8863 = vmatprep.subr.mxu0 %v8413
  %8864 = vmatpush1.msra.mxu0 %v8412
  %8865 = vmatprep.subr.mxu0 %v8400
  %8866 = vmatpush1.msra.mxu0 %v8399
  %8867 = vmatprep.subr.mxu0 0.0
  %8868 = vmatpush2.msra.mxu0 0.0
  %8869 = vmatprep.subr.mxu0 0.0
  %8870 = vmatpush2.msra.mxu0 0.0
  %8871 = vmatprep.subr.mxu0 0.0
  %8872 = vmatpush2.msra.mxu0 0.0
  %8873 = vmatprep.subr.mxu0 0.0
  %8874 = vmatpush2.msra.mxu0 0.0
  %8875 = vmatprep.subr.mxu0 0.0
  %8876 = vmatpush2.msra.mxu0 0.0
  %8877 = vmatprep.subr.mxu0 0.0
  %8878 = vmatpush2.msra.mxu0 0.0
  %8879 = vmatprep.subr.mxu0 0.0
  %8880 = vmatpush2.msra.mxu0 0.0
  %8881 = vmatprep.subr.mxu0 %v8735
  %8882 = vmatpush2.msra.mxu0 %v8732
  %8883 = vmatprep.subr.mxu0 %v8699
  %8884 = vmatpush2.msra.mxu0 %v8698
  %8885 = vmatprep.subr.mxu0 %v8686
  %8886 = vmatpush2.msra.mxu0 %v8685
  %8887 = vmatprep.subr.mxu0 %v8673
  %8888 = vmatpush2.msra.mxu0 %v8672
  %8889 = vmatprep.subr.mxu0 %v8660
  %8890 = vmatpush2.msra.mxu0 %v8659
  %8891 = vmatprep.subr.mxu0 %v8647
  %8892 = vmatpush2.msra.mxu0 %v8646
  %8893 = vmatprep.subr.mxu0 %v8634
  %8894 = vmatpush2.msra.mxu0 %v8633
  %8895 = vmatprep.subr.mxu0 %v8621
  %8896 = vmatpush2.msra.mxu0 %v8620
  %8897 = vmatprep.subr.mxu0 %v8608
  %8898 = vmatpush2.msra.mxu0 %v8607
  %8899 = vmatprep.mubr.f32.mxu0 %v8723
  %8900 = vmatmul.mubr.f32.gmra.mxu0 %v8394
  %v8901 = vpop.f32.mrf.mxu0
  %v8902 = vadd.f32 0.0, %v8901
  %v8903 = vpop.f32.mrf.mxu0
  %v8904 = vadd.f32 0.0, %v8903
  %8905 = vdwg.mxu0
  %8906 = vmatprep.subr.mxu0 %v8597
  %8907 = vmatpush1.msra.mxu0 %v8596
  %8908 = vmatprep.subr.mxu0 %v8584
  %8909 = vmatpush1.msra.mxu0 %v8583
  %8910 = vmatprep.subr.mxu0 %v8571
  %8911 = vmatpush1.msra.mxu0 %v8570
  %8912 = vmatprep.subr.mxu0 %v8558
  %8913 = vmatpush1.msra.mxu0 %v8557
  %8914 = vmatprep.subr.mxu0 %v8545
  %8915 = vmatpush1.msra.mxu0 %v8544
  %8916 = vmatprep.subr.mxu0 %v8532
  %8917 = vmatpush1.msra.mxu0 %v8531
  %8918 = vmatprep.subr.mxu0 %v8519
  %8919 = vmatpush1.msra.mxu0 %v8518
  %8920 = vmatprep.subr.mxu0 %v8506
  %8921 = vmatpush1.msra.mxu0 %v8505
  %8922 = vmatprep.subr.mxu0 %v8493
  %8923 = vmatpush1.msra.mxu0 %v8492
  %8924 = vmatprep.subr.mxu0 %v8480
  %8925 = vmatpush1.msra.mxu0 %v8479
  %8926 = vmatprep.subr.mxu0 %v8467
  %8927 = vmatpush1.msra.mxu0 %v8466
  %8928 = vmatprep.subr.mxu0 %v8454
  %8929 = vmatpush1.msra.mxu0 %v8453
  %8930 = vmatprep.subr.mxu0 %v8441
  %8931 = vmatpush1.msra.mxu0 %v8440
  %8932 = vmatprep.subr.mxu0 %v8428
  %8933 = vmatpush1.msra.mxu0 %v8427
  %8934 = vmatprep.subr.mxu0 %v8415
  %8935 = vmatpush1.msra.mxu0 %v8414
  %8936 = vmatprep.subr.mxu0 %v8402
  %8937 = vmatpush1.msra.mxu0 %v8401
  %8938 = vmatprep.subr.mxu0 0.0
  %8939 = vmatpush2.msra.mxu0 0.0
  %8940 = vmatprep.subr.mxu0 0.0
  %8941 = vmatpush2.msra.mxu0 0.0
  %8942 = vmatprep.subr.mxu0 0.0
  %8943 = vmatpush2.msra.mxu0 0.0
  %8944 = vmatprep.subr.mxu0 0.0
  %8945 = vmatpush2.msra.mxu0 0.0
  %8946 = vmatprep.subr.mxu0 0.0
  %8947 = vmatpush2.msra.mxu0 0.0
  %8948 = vmatprep.subr.mxu0 0.0
  %8949 = vmatpush2.msra.mxu0 0.0
  %8950 = vmatprep.subr.mxu0 0.0
  %8951 = vmatpush2.msra.mxu0 0.0
  %8952 = vmatprep.subr.mxu0 %v8741
  %8953 = vmatpush2.msra.mxu0 %v8738
  %8954 = vmatprep.subr.mxu0 %v8701
  %8955 = vmatpush2.msra.mxu0 %v8700
  %8956 = vmatprep.subr.mxu0 %v8688
  %8957 = vmatpush2.msra.mxu0 %v8687
  %8958 = vmatprep.subr.mxu0 %v8675
  %8959 = vmatpush2.msra.mxu0 %v8674
  %8960 = vmatprep.subr.mxu0 %v8662
  %8961 = vmatpush2.msra.mxu0 %v8661
  %8962 = vmatprep.subr.mxu0 %v8649
  %8963 = vmatpush2.msra.mxu0 %v8648
  %8964 = vmatprep.subr.mxu0 %v8636
  %8965 = vmatpush2.msra.mxu0 %v8635
  %8966 = vmatprep.subr.mxu0 %v8623
  %8967 = vmatpush2.msra.mxu0 %v8622
  %8968 = vmatprep.subr.mxu0 %v8610
  %8969 = vmatpush2.msra.mxu0 %v8609
  %8970 = vmatprep.mubr.f32.mxu0 %v8723
  %8971 = vmatmul.mubr.f32.gmra.mxu0 %v8394
  %v8972 = vpop.f32.mrf.mxu0
  %v8973 = vadd.f32 0.0, %v8972
  %v8974 = vpop.f32.mrf.mxu0
  %v8975 = vadd.f32 0.0, %v8974
  %8976 = vdwg.mxu0
  %8977 = vmatprep.subr.mxu0 %v8599
  %8978 = vmatpush1.msra.mxu0 %v8598
  %8979 = vmatprep.subr.mxu0 %v8586
  %8980 = vmatpush1.msra.mxu0 %v8585
  %8981 = vmatprep.subr.mxu0 %v8573
  %8982 = vmatpush1.msra.mxu0 %v8572
  %8983 = vmatprep.subr.mxu0 %v8560
  %8984 = vmatpush1.msra.mxu0 %v8559
  %8985 = vmatprep.subr.mxu0 %v8547
  %8986 = vmatpush1.msra.mxu0 %v8546
  %8987 = vmatprep.subr.mxu0 %v8534
  %8988 = vmatpush1.msra.mxu0 %v8533
  %8989 = vmatprep.subr.mxu0 %v8521
  %8990 = vmatpush1.msra.mxu0 %v8520
  %8991 = vmatprep.subr.mxu0 %v8508
  %8992 = vmatpush1.msra.mxu0 %v8507
  %8993 = vmatprep.subr.mxu0 %v8495
  %8994 = vmatpush1.msra.mxu0 %v8494
  %8995 = vmatprep.subr.mxu0 %v8482
  %8996 = vmatpush1.msra.mxu0 %v8481
  %8997 = vmatprep.subr.mxu0 %v8469
  %8998 = vmatpush1.msra.mxu0 %v8468
  %8999 = vmatprep.subr.mxu0 %v8456
  %9000 = vmatpush1.msra.mxu0 %v8455
  %9001 = vmatprep.subr.mxu0 %v8443
  %9002 = vmatpush1.msra.mxu0 %v8442
  %9003 = vmatprep.subr.mxu0 %v8430
  %9004 = vmatpush1.msra.mxu0 %v8429
  %9005 = vmatprep.subr.mxu0 %v8417
  %9006 = vmatpush1.msra.mxu0 %v8416
  %9007 = vmatprep.subr.mxu0 %v8404
  %9008 = vmatpush1.msra.mxu0 %v8403
  %9009 = vmatprep.subr.mxu0 0.0
  %9010 = vmatpush2.msra.mxu0 0.0
  %9011 = vmatprep.subr.mxu0 0.0
  %9012 = vmatpush2.msra.mxu0 0.0
  %9013 = vmatprep.subr.mxu0 0.0
  %9014 = vmatpush2.msra.mxu0 0.0
  %9015 = vmatprep.subr.mxu0 0.0
  %9016 = vmatpush2.msra.mxu0 0.0
  %9017 = vmatprep.subr.mxu0 0.0
  %9018 = vmatpush2.msra.mxu0 0.0
  %9019 = vmatprep.subr.mxu0 0.0
  %9020 = vmatpush2.msra.mxu0 0.0
  %9021 = vmatprep.subr.mxu0 0.0
  %9022 = vmatpush2.msra.mxu0 0.0
  %9023 = vmatprep.subr.mxu0 %v8747
  %9024 = vmatpush2.msra.mxu0 %v8744
  %9025 = vmatprep.subr.mxu0 %v8703
  %9026 = vmatpush2.msra.mxu0 %v8702
  %9027 = vmatprep.subr.mxu0 %v8690
  %9028 = vmatpush2.msra.mxu0 %v8689
  %9029 = vmatprep.subr.mxu0 %v8677
  %9030 = vmatpush2.msra.mxu0 %v8676
  %9031 = vmatprep.subr.mxu0 %v8664
  %9032 = vmatpush2.msra.mxu0 %v8663
  %9033 = vmatprep.subr.mxu0 %v8651
  %9034 = vmatpush2.msra.mxu0 %v8650
  %9035 = vmatprep.subr.mxu0 %v8638
  %9036 = vmatpush2.msra.mxu0 %v8637
  %9037 = vmatprep.subr.mxu0 %v8625
  %9038 = vmatpush2.msra.mxu0 %v8624
  %9039 = vmatprep.subr.mxu0 %v8612
  %9040 = vmatpush2.msra.mxu0 %v8611
  %9041 = vmatprep.mubr.f32.mxu0 %v8723
  %9042 = vmatmul.mubr.f32.gmra.mxu0 %v8394
  %v9043 = vpop.f32.mrf.mxu0
  %v9044 = vadd.f32 0.0, %v9043
  %v9045 = vpop.f32.mrf.mxu0
  %v9046 = vadd.f32 0.0, %v9045
  %9047 = vdwg.mxu0
  %9048 = vmatprep.subr.mxu0 %v8601
  %9049 = vmatpush1.msra.mxu0 %v8600
  %9050 = vmatprep.subr.mxu0 %v8588
  %9051 = vmatpush1.msra.mxu0 %v8587
  %9052 = vmatprep.subr.mxu0 %v8575
  %9053 = vmatpush1.msra.mxu0 %v8574
  %9054 = vmatprep.subr.mxu0 %v8562
  %9055 = vmatpush1.msra.mxu0 %v8561
  %9056 = vmatprep.subr.mxu0 %v8549
  %9057 = vmatpush1.msra.mxu0 %v8548
  %9058 = vmatprep.subr.mxu0 %v8536
  %9059 = vmatpush1.msra.mxu0 %v8535
  %9060 = vmatprep.subr.mxu0 %v8523
  %9061 = vmatpush1.msra.mxu0 %v8522
  %9062 = vmatprep.subr.mxu0 %v8510
  %9063 = vmatpush1.msra.mxu0 %v8509
  %9064 = vmatprep.subr.mxu0 %v8497
  %9065 = vmatpush1.msra.mxu0 %v8496
  %9066 = vmatprep.subr.mxu0 %v8484
  %9067 = vmatpush1.msra.mxu0 %v8483
  %9068 = vmatprep.subr.mxu0 %v8471
  %9069 = vmatpush1.msra.mxu0 %v8470
  %9070 = vmatprep.subr.mxu0 %v8458
  %9071 = vmatpush1.msra.mxu0 %v8457
  %9072 = vmatprep.subr.mxu0 %v8445
  %9073 = vmatpush1.msra.mxu0 %v8444
  %9074 = vmatprep.subr.mxu0 %v8432
  %9075 = vmatpush1.msra.mxu0 %v8431
  %9076 = vmatprep.subr.mxu0 %v8419
  %9077 = vmatpush1.msra.mxu0 %v8418
  %9078 = vmatprep.subr.mxu0 %v8406
  %9079 = vmatpush1.msra.mxu0 %v8405
  %9080 = vmatprep.subr.mxu0 0.0
  %9081 = vmatpush2.msra.mxu0 0.0
  %9082 = vmatprep.subr.mxu0 0.0
  %9083 = vmatpush2.msra.mxu0 0.0
  %9084 = vmatprep.subr.mxu0 0.0
  %9085 = vmatpush2.msra.mxu0 0.0
  %9086 = vmatprep.subr.mxu0 0.0
  %9087 = vmatpush2.msra.mxu0 0.0
  %9088 = vmatprep.subr.mxu0 0.0
  %9089 = vmatpush2.msra.mxu0 0.0
  %9090 = vmatprep.subr.mxu0 0.0
  %9091 = vmatpush2.msra.mxu0 0.0
  %9092 = vmatprep.subr.mxu0 0.0
  %9093 = vmatpush2.msra.mxu0 0.0
  %9094 = vmatprep.subr.mxu0 %v8753
  %9095 = vmatpush2.msra.mxu0 %v8750
  %9096 = vmatprep.subr.mxu0 %v8705
  %9097 = vmatpush2.msra.mxu0 %v8704
  %9098 = vmatprep.subr.mxu0 %v8692
  %9099 = vmatpush2.msra.mxu0 %v8691
  %9100 = vmatprep.subr.mxu0 %v8679
  %9101 = vmatpush2.msra.mxu0 %v8678
  %9102 = vmatprep.subr.mxu0 %v8666
  %9103 = vmatpush2.msra.mxu0 %v8665
  %9104 = vmatprep.subr.mxu0 %v8653
  %9105 = vmatpush2.msra.mxu0 %v8652
  %9106 = vmatprep.subr.mxu0 %v8640
  %9107 = vmatpush2.msra.mxu0 %v8639
  %9108 = vmatprep.subr.mxu0 %v8627
  %9109 = vmatpush2.msra.mxu0 %v8626
  %9110 = vmatprep.subr.mxu0 %v8614
  %9111 = vmatpush2.msra.mxu0 %v8613
  %9112 = vmatprep.mubr.f32.mxu0 %v8723
  %9113 = vmatmul.mubr.f32.gmra.mxu0 %v8394
  %v9114 = vpop.f32.mrf.mxu0
  %v9115 = vadd.f32 0.0, %v9114
  %v9116 = vpop.f32.mrf.mxu0
  %v9117 = vadd.f32 0.0, %v9116
  %9118 = vdwg.mxu0
  %9119 = vmatprep.subr.mxu0 %v8603
  %9120 = vmatpush1.msra.mxu0 %v8602
  %9121 = vmatprep.subr.mxu0 %v8590
  %9122 = vmatpush1.msra.mxu0 %v8589
  %9123 = vmatprep.subr.mxu0 %v8577
  %9124 = vmatpush1.msra.mxu0 %v8576
  %9125 = vmatprep.subr.mxu0 %v8564
  %9126 = vmatpush1.msra.mxu0 %v8563
  %9127 = vmatprep.subr.mxu0 %v8551
  %9128 = vmatpush1.msra.mxu0 %v8550
  %9129 = vmatprep.subr.mxu0 %v8538
  %9130 = vmatpush1.msra.mxu0 %v8537
  %9131 = vmatprep.subr.mxu0 %v8525
  %9132 = vmatpush1.msra.mxu0 %v8524
  %9133 = vmatprep.subr.mxu0 %v8512
  %9134 = vmatpush1.msra.mxu0 %v8511
  %9135 = vmatprep.subr.mxu0 %v8499
  %9136 = vmatpush1.msra.mxu0 %v8498
  %9137 = vmatprep.subr.mxu0 %v8486
  %9138 = vmatpush1.msra.mxu0 %v8485
  %9139 = vmatprep.subr.mxu0 %v8473
  %9140 = vmatpush1.msra.mxu0 %v8472
  %9141 = vmatprep.subr.mxu0 %v8460
  %9142 = vmatpush1.msra.mxu0 %v8459
  %9143 = vmatprep.subr.mxu0 %v8447
  %9144 = vmatpush1.msra.mxu0 %v8446
  %9145 = vmatprep.subr.mxu0 %v8434
  %9146 = vmatpush1.msra.mxu0 %v8433
  %9147 = vmatprep.subr.mxu0 %v8421
  %9148 = vmatpush1.msra.mxu0 %v8420
  %9149 = vmatprep.subr.mxu0 %v8408
  %9150 = vmatpush1.msra.mxu0 %v8407
  %9151 = vmatprep.subr.mxu0 0.0
  %9152 = vmatpush2.msra.mxu0 0.0
  %9153 = vmatprep.subr.mxu0 0.0
  %9154 = vmatpush2.msra.mxu0 0.0
  %9155 = vmatprep.subr.mxu0 0.0
  %9156 = vmatpush2.msra.mxu0 0.0
  %9157 = vmatprep.subr.mxu0 0.0
  %9158 = vmatpush2.msra.mxu0 0.0
  %9159 = vmatprep.subr.mxu0 0.0
  %9160 = vmatpush2.msra.mxu0 0.0
  %9161 = vmatprep.subr.mxu0 0.0
  %9162 = vmatpush2.msra.mxu0 0.0
  %9163 = vmatprep.subr.mxu0 0.0
  %9164 = vmatpush2.msra.mxu0 0.0
  %9165 = vmatprep.subr.mxu0 %v8759
  %9166 = vmatpush2.msra.mxu0 %v8756
  %9167 = vmatprep.subr.mxu0 %v8707
  %9168 = vmatpush2.msra.mxu0 %v8706
  %9169 = vmatprep.subr.mxu0 %v8694
  %9170 = vmatpush2.msra.mxu0 %v8693
  %9171 = vmatprep.subr.mxu0 %v8681
  %9172 = vmatpush2.msra.mxu0 %v8680
  %9173 = vmatprep.subr.mxu0 %v8668
  %9174 = vmatpush2.msra.mxu0 %v8667
  %9175 = vmatprep.subr.mxu0 %v8655
  %9176 = vmatpush2.msra.mxu0 %v8654
  %9177 = vmatprep.subr.mxu0 %v8642
  %9178 = vmatpush2.msra.mxu0 %v8641
  %9179 = vmatprep.subr.mxu0 %v8629
  %9180 = vmatpush2.msra.mxu0 %v8628
  %9181 = vmatprep.subr.mxu0 %v8616
  %9182 = vmatpush2.msra.mxu0 %v8615
  %9183 = vmatprep.mubr.f32.mxu0 %v8723
  %9184 = vmatmul.mubr.f32.gmra.mxu0 %v8394
  %v9185 = vpop.f32.mrf.mxu0
  %v9186 = vadd.f32 0.0, %v9185
  %v9187 = vpop.f32.mrf.mxu0
  %v9188 = vadd.f32 0.0, %v9187
  %9189 = vdwg.mxu0
  %9190 = vmatprep.subr.mxu0 0.0
  %9191 = vmatpush1.msra.mxu0 %v8604
  %9192 = vmatprep.subr.mxu0 0.0
  %9193 = vmatpush1.msra.mxu0 %v8591
  %9194 = vmatprep.subr.mxu0 0.0
  %9195 = vmatpush1.msra.mxu0 %v8578
  %9196 = vmatprep.subr.mxu0 0.0
  %9197 = vmatpush1.msra.mxu0 %v8565
  %9198 = vmatprep.subr.mxu0 0.0
  %9199 = vmatpush1.msra.mxu0 %v8552
  %9200 = vmatprep.subr.mxu0 0.0
  %9201 = vmatpush1.msra.mxu0 %v8539
  %9202 = vmatprep.subr.mxu0 0.0
  %9203 = vmatpush1.msra.mxu0 %v8526
  %9204 = vmatprep.subr.mxu0 0.0
  %9205 = vmatpush1.msra.mxu0 %v8513
  %9206 = vmatprep.subr.mxu0 0.0
  %9207 = vmatpush1.msra.mxu0 %v8500
  %9208 = vmatprep.subr.mxu0 0.0
  %9209 = vmatpush1.msra.mxu0 %v8487
  %9210 = vmatprep.subr.mxu0 0.0
  %9211 = vmatpush1.msra.mxu0 %v8474
  %9212 = vmatprep.subr.mxu0 0.0
  %9213 = vmatpush1.msra.mxu0 %v8461
  %9214 = vmatprep.subr.mxu0 0.0
  %9215 = vmatpush1.msra.mxu0 %v8448
  %9216 = vmatprep.subr.mxu0 0.0
  %9217 = vmatpush1.msra.mxu0 %v8435
  %9218 = vmatprep.subr.mxu0 0.0
  %9219 = vmatpush1.msra.mxu0 %v8422
  %9220 = vmatprep.subr.mxu0 0.0
  %9221 = vmatpush1.msra.mxu0 %v8409
  %9222 = vmatprep.subr.mxu0 0.0
  %9223 = vmatpush2.msra.mxu0 0.0
  %9224 = vmatprep.subr.mxu0 0.0
  %9225 = vmatpush2.msra.mxu0 0.0
  %9226 = vmatprep.subr.mxu0 0.0
  %9227 = vmatpush2.msra.mxu0 0.0
  %9228 = vmatprep.subr.mxu0 0.0
  %9229 = vmatpush2.msra.mxu0 0.0
  %9230 = vmatprep.subr.mxu0 0.0
  %9231 = vmatpush2.msra.mxu0 0.0
  %9232 = vmatprep.subr.mxu0 0.0
  %9233 = vmatpush2.msra.mxu0 0.0
  %9234 = vmatprep.subr.mxu0 0.0
  %9235 = vmatpush2.msra.mxu0 0.0
  %9236 = vmatprep.subr.mxu0 0.0
  %9237 = vmatpush2.msra.mxu0 %v8762
  %9238 = vmatprep.subr.mxu0 0.0
  %9239 = vmatpush2.msra.mxu0 %v8708
  %9240 = vmatprep.subr.mxu0 0.0
  %9241 = vmatpush2.msra.mxu0 %v8695
  %9242 = vmatprep.subr.mxu0 0.0
  %9243 = vmatpush2.msra.mxu0 %v8682
  %9244 = vmatprep.subr.mxu0 0.0
  %9245 = vmatpush2.msra.mxu0 %v8669
  %9246 = vmatprep.subr.mxu0 0.0
  %9247 = vmatpush2.msra.mxu0 %v8656
  %9248 = vmatprep.subr.mxu0 0.0
  %9249 = vmatpush2.msra.mxu0 %v8643
  %9250 = vmatprep.subr.mxu0 0.0
  %9251 = vmatpush2.msra.mxu0 %v8630
  %9252 = vmatprep.subr.mxu0 0.0
  %9253 = vmatpush2.msra.mxu0 %v8617
  %9254 = vmatprep.mubr.f32.mxu0 %v8723
  %9255 = vmatmul.mubr.f32.gmra.mxu0 %v8394
  %v9256 = vpop.f32.mrf.mxu0
  %v9257 = vadd.f32 0.0, %v9256
  %v9258 = vpop.f32.mrf.mxu0
  %9259 = vdwg.mxu0
  %v9260 = vadd.f32 %v8341, %v8831
  %v9261 = vadd.f32 %v8342, %v8833
  %v9262 = vadd.f32 %v8343, %v8902
  %v9263 = vadd.f32 %v8344, %v8904
  %v9264 = vadd.f32 %v8345, %v8973
  %v9265 = vadd.f32 %v8346, %v8975
  %v9266 = vadd.f32 %v8347, %v9044
  %v9267 = vadd.f32 %v8348, %v9046
  %v9268 = vadd.f32 %v8349, %v9115
  %v9269 = vadd.f32 %v8350, %v9117
  %v9270 = vadd.f32 %v8351, %v9186
  %v9271 = vadd.f32 %v8352, %v9188
  %v9272 = vadd.f32 %v8353, %v9257
  %v9273 = vrot.slane %v914, 4
  %v9274 = vrot.slane %v916, 4
  %v9277 = vrot.slane %v1583, 3
  %v9278 = vrot.slane %v1585, 3
  %v9281 = vrot.slane %v2252, 2
  %v9282 = vrot.slane %v2254, 2
  %v9285 = vrot.slane %v2921, 1
  %v9286 = vrot.slane %v2923, 1
  %v9289 = vrot.slane %v4259, 7
  %v9290 = vrot.slane %v4261, 7
  %v9293 = vrot.slane %v4928, 6
  %v9294 = vrot.slane %v4930, 6
  %v9297 = vrot.slane %v5597, 5
  %v9298 = vrot.slane %v5599, 5
  %v9301 = vsel %vm5643, %v9273, %v9277
  %v9302 = vsel %vm5643, %v9274, %v9278
  %v9303 = vsel %vm5646, %v9301, %v9281
  %v9304 = vsel %vm5646, %v9302, %v9282
  %v9305 = vsel %vm318, %v9303, %v9285
  %v9306 = vsel %vm318, %v9304, %v9286
  %v9307 = vsel %vm5651, %v9305, %v3590
  %v9308 = vsel %vm5651, %v9306, %v3592
  %v9309 = vsel %vm5654, %v9307, %v9289
  %v9310 = vsel %vm5654, %v9308, %v9290
  %v9311 = vsel %vm5657, %v9309, %v9293
  %v9312 = vsel %vm5657, %v9310, %v9294
  %v9313 = vsel %vm5660, %v9311, %v9297
  %v9314 = vsel %vm5660, %v9312, %v9298
  %s9315 = scalar_lea.vmem %s4, 10400
  %v9316 = vld [vmem:[%s9315] sm:$0xff]
  %v9317 = vld [vmem:[%s9315 + $0x8] sm:$0xff]
  %v9318 = vld [vmem:[%s9315 + $0x10] sm:$0xff]
  %v9319 = vld [vmem:[%s9315 + $0x18] sm:$0xff]
  %v9320 = vld [vmem:[%s9315 + $0x20] sm:$0xff]
  %v9321 = vld [vmem:[%s9315 + $0x28] sm:$0xff]
  %v9322 = vld [vmem:[%s9315 + $0x30] sm:$0xff]
  %v9323 = vld [vmem:[%s9315 + $0x38] sm:$0xff]
  %v9324 = vld [vmem:[%s9315 + $0x40] sm:$0xff]
  %v9325 = vld [vmem:[%s9315 + $0x48] sm:$0xff]
  %v9326 = vld [vmem:[%s9315 + $0x50] sm:$0xff]
  %v9327 = vld [vmem:[%s9315 + $0x58] sm:$0xff]
  %v9328 = vld [vmem:[%s9315 + $0x60] sm:$0xff]
  %v9329 = vld [vmem:[%s9315 + $0x68] sm:$0xff]
  %v9330 = vld [vmem:[%s9315 + $0x70] sm:$0xff]
  %v9331 = vld [vmem:[%s9315 + $0x78] sm:$0xff]
  %v9332 = vld [vmem:[%s9315 + $0x80] sm:$0xff]
  %v9333 = vld [vmem:[%s9315 + $0x88] sm:$0xff]
  %v9334 = vld [vmem:[%s9315 + $0x90] sm:$0xff]
  %v9335 = vld [vmem:[%s9315 + $0x98] sm:$0xff]
  %v9336 = vld [vmem:[%s9315 + $0xa0] sm:$0xff]
  %v9337 = vld [vmem:[%s9315 + $0xa8] sm:$0xff]
  %v9338 = vld [vmem:[%s9315 + $0xb0] sm:$0xff]
  %v9339 = vld [vmem:[%s9315 + $0xb8] sm:$0xff]
  %v9340 = vld [vmem:[%s9315 + $0xc0] sm:$0xff]
  %v9341 = vld [vmem:[%s9315 + $0xc8] sm:$0xff]
  %v9342 = vld [vmem:[%s9315 + $0xd0] sm:$0xff]
  %v9343 = vld [vmem:[%s9315 + $0xd8] sm:$0xff]
  %v9344 = vld [vmem:[%s9315 + $0xe0] sm:$0xff]
  %v9345 = vld [vmem:[%s9315 + $0xe8] sm:$0xff]
  %v9346 = vld [vmem:[%s9315 + $0xf0] sm:$0xff]
  %v9347 = vld [vmem:[%s9315 + $0xf8] sm:$0xff]
  %v9348 = vld [vmem:[%s9315 + $0x100] sm:$0xff]
  %v9349 = vld [vmem:[%s9315 + $0x108] sm:$0xff]
  %v9350 = vld [vmem:[%s9315 + $0x110] sm:$0xff]
  %v9351 = vld [vmem:[%s9315 + $0x118] sm:$0xff]
  %v9352 = vld [vmem:[%s9315 + $0x120] sm:$0xff]
  %v9353 = vld [vmem:[%s9315 + $0x128] sm:$0xff]
  %v9354 = vld [vmem:[%s9315 + $0x130] sm:$0xff]
  %v9355 = vld [vmem:[%s9315 + $0x138] sm:$0xff]
  %v9356 = vld [vmem:[%s9315 + $0x140] sm:$0xff]
  %v9357 = vld [vmem:[%s9315 + $0x148] sm:$0xff]
  %v9358 = vld [vmem:[%s9315 + $0x150] sm:$0xff]
  %v9359 = vld [vmem:[%s9315 + $0x158] sm:$0xff]
  %v9360 = vld [vmem:[%s9315 + $0x160] sm:$0xff]
  %v9361 = vld [vmem:[%s9315 + $0x168] sm:$0xff]
  %v9362 = vld [vmem:[%s9315 + $0x170] sm:$0xff]
  %v9363 = vld [vmem:[%s9315 + $0x178] sm:$0xff]
  %v9364 = vld [vmem:[%s9315 + $0x180] sm:$0xff]
  %v9365 = vld [vmem:[%s9315 + $0x188] sm:$0xff]
  %v9366 = vld [vmem:[%s9315 + $0x190] sm:$0xff]
  %v9367 = vld [vmem:[%s9315 + $0x198] sm:$0xff]
  %v9368 = vld [vmem:[%s9315 + $0x1a0] sm:$0xff]
  %v9369 = vld [vmem:[%s9315 + $0x1a8] sm:$0xff]
  %v9370 = vld [vmem:[%s9315 + $0x1b0] sm:$0xff]
  %v9371 = vld [vmem:[%s9315 + $0x1b8] sm:$0xff]
  %v9372 = vld [vmem:[%s9315 + $0x1c0] sm:$0xff]
  %v9373 = vld [vmem:[%s9315 + $0x1c8] sm:$0xff]
  %v9374 = vld [vmem:[%s9315 + $0x1d0] sm:$0xff]
  %v9375 = vld [vmem:[%s9315 + $0x1d8] sm:$0xff]
  %v9376 = vld [vmem:[%s9315 + $0x1e0] sm:$0xff]
  %v9377 = vld [vmem:[%s9315 + $0x1e8] sm:$0xff]
  %v9378 = vld [vmem:[%s9315 + $0x1f0] sm:$0xff]
  %v9379 = vld [vmem:[%s9315 + $0x1f8] sm:$0xff]
  %v9380 = vld [vmem:[%s9315 + $0x200] sm:$0xff]
  %v9381 = vld [vmem:[%s9315 + $0x208] sm:$0xff]
  %v9382 = vld [vmem:[%s9315 + $0x210] sm:$0xff]
  %v9383 = vld [vmem:[%s9315 + $0x218] sm:$0xff]
  %v9384 = vld [vmem:[%s9315 + $0x220] sm:$0xff]
  %v9385 = vld [vmem:[%s9315 + $0x228] sm:$0xff]
  %v9386 = vld [vmem:[%s9315 + $0x230] sm:$0xff]
  %v9387 = vld [vmem:[%s9315 + $0x238] sm:$0xff]
  %v9388 = vld [vmem:[%s9315 + $0x240] sm:$0xff]
  %v9389 = vld [vmem:[%s9315 + $0x248] sm:$0xff]
  %v9390 = vld [vmem:[%s9315 + $0x250] sm:$0xff]
  %v9391 = vld [vmem:[%s9315 + $0x258] sm:$0xff]
  %v9392 = vld [vmem:[%s9315 + $0x260] sm:$0xff]
  %v9393 = vld [vmem:[%s9315 + $0x268] sm:$0xff]
  %v9394 = vld [vmem:[%s9315 + $0x270] sm:$0xff]
  %v9395 = vld [vmem:[%s9315 + $0x278] sm:$0xff]
  %v9396 = vld [vmem:[%s9315 + $0x280] sm:$0xff]
  %v9397 = vld [vmem:[%s9315 + $0x288] sm:$0xff]
  %v9398 = vld [vmem:[%s9315 + $0x290] sm:$0xff]
  %v9399 = vld [vmem:[%s9315 + $0x298] sm:$0xff]
  %v9400 = vld [vmem:[%s9315 + $0x2a0] sm:$0xff]
  %v9401 = vld [vmem:[%s9315 + $0x2a8] sm:$0xff]
  %v9402 = vld [vmem:[%s9315 + $0x2b0] sm:$0xff]
  %v9403 = vld [vmem:[%s9315 + $0x2b8] sm:$0xff]
  %v9404 = vld [vmem:[%s9315 + $0x2c0] sm:$0xff]
  %v9405 = vld [vmem:[%s9315 + $0x2c8] sm:$0xff]
  %v9406 = vld [vmem:[%s9315 + $0x2d0] sm:$0xff]
  %v9407 = vld [vmem:[%s9315 + $0x2d8] sm:$0xff]
  %v9408 = vld [vmem:[%s9315 + $0x2e0] sm:$0xff]
  %v9409 = vld [vmem:[%s9315 + $0x2e8] sm:$0xff]
  %v9410 = vld [vmem:[%s9315 + $0x2f0] sm:$0xff]
  %v9411 = vld [vmem:[%s9315 + $0x2f8] sm:$0xff]
  %v9412 = vld [vmem:[%s9315 + $0x300] sm:$0xff]
  %v9413 = vld [vmem:[%s9315 + $0x308] sm:$0xff]
  %v9414 = vld [vmem:[%s9315 + $0x310] sm:$0xff]
  %v9415 = vld [vmem:[%s9315 + $0x318] sm:$0xff]
  %v9416 = vld [vmem:[%s9315 + $0x320] sm:$0xff]
  %v9417 = vld [vmem:[%s9315 + $0x328] sm:$0xff]
  %v9418 = vld [vmem:[%s9315 + $0x330] sm:$0xff]
  %v9419 = vld [vmem:[%s9315 + $0x338] sm:$0xff]
  %v9420 = vld [vmem:[%s9315 + $0x340] sm:$0xff]
  %v9421 = vld [vmem:[%s9315 + $0x348] sm:$0xff]
  %v9422 = vld [vmem:[%s9315 + $0x350] sm:$0xff]
  %v9423 = vld [vmem:[%s9315 + $0x358] sm:$0xff]
  %v9424 = vld [vmem:[%s9315 + $0x360] sm:$0xff]
  %v9425 = vld [vmem:[%s9315 + $0x368] sm:$0xff]
  %v9426 = vld [vmem:[%s9315 + $0x370] sm:$0xff]
  %v9427 = vld [vmem:[%s9315 + $0x378] sm:$0xff]
  %v9428 = vld [vmem:[%s9315 + $0x380] sm:$0xff]
  %v9429 = vld [vmem:[%s9315 + $0x388] sm:$0xff]
  %v9430 = vld [vmem:[%s9315 + $0x390] sm:$0xff]
  %v9431 = vld [vmem:[%s9315 + $0x398] sm:$0xff]
  %v9432 = vld [vmem:[%s9315 + $0x3a0] sm:$0xff]
  %v9433 = vld [vmem:[%s9315 + $0x3a8] sm:$0xff]
  %v9434 = vld [vmem:[%s9315 + $0x3b0] sm:$0xff]
  %v9435 = vld [vmem:[%s9315 + $0x3b8] sm:$0xff]
  %v9436 = vld [vmem:[%s9315 + $0x3c0] sm:$0xff]
  %v9437 = vld [vmem:[%s9315 + $0x3c8] sm:$0xff]
  %v9438 = vld [vmem:[%s9315 + $0x3d0] sm:$0xff]
  %v9439 = vld [vmem:[%s9315 + $0x3d8] sm:$0xff]
  %v9440 = vld [vmem:[%s9315 + $0x3e0] sm:$0xff]
  %v9441 = vld [vmem:[%s9315 + $0x3e8] sm:$0xff]
  %v9442 = vld [vmem:[%s9315 + $0x3f0] sm:$0xff]
  %v9443 = vld [vmem:[%s9315 + $0x3f8] sm:$0xff]
  %v9444 = vld [vmem:[%s9315 + $0x400] sm:$0xff]
  %v9445 = vld [vmem:[%s9315 + $0x408] sm:$0xff]
  %v9446 = vld [vmem:[%s9315 + $0x410] sm:$0xff]
  %v9447 = vld [vmem:[%s9315 + $0x418] sm:$0xff]
  %v9448 = vld [vmem:[%s9315 + $0x420] sm:$0xff]
  %v9449 = vld [vmem:[%s9315 + $0x428] sm:$0xff]
  %v9450 = vld [vmem:[%s9315 + $0x430] sm:$0xff]
  %v9451 = vld [vmem:[%s9315 + $0x438] sm:$0xff]
  %v9452 = vld [vmem:[%s9315 + $0x440] sm:$0xff]
  %v9453 = vld [vmem:[%s9315 + $0x448] sm:$0xff]
  %v9454 = vld [vmem:[%s9315 + $0x450] sm:$0xff]
  %v9455 = vld [vmem:[%s9315 + $0x458] sm:$0xff]
  %v9456 = vld [vmem:[%s9315 + $0x460] sm:$0xff]
  %v9457 = vld [vmem:[%s9315 + $0x468] sm:$0xff]
  %v9458 = vld [vmem:[%s9315 + $0x470] sm:$0xff]
  %v9459 = vld [vmem:[%s9315 + $0x478] sm:$0xff]
  %v9460 = vld [vmem:[%s9315 + $0x480] sm:$0xff]
  %v9461 = vld [vmem:[%s9315 + $0x488] sm:$0xff]
  %v9462 = vld [vmem:[%s9315 + $0x490] sm:$0xff]
  %v9463 = vld [vmem:[%s9315 + $0x498] sm:$0xff]
  %v9464 = vld [vmem:[%s9315 + $0x4a0] sm:$0xff]
  %v9465 = vld [vmem:[%s9315 + $0x4a8] sm:$0xff]
  %v9466 = vld [vmem:[%s9315 + $0x4b0] sm:$0xff]
  %v9467 = vld [vmem:[%s9315 + $0x4b8] sm:$0xff]
  %v9468 = vld [vmem:[%s9315 + $0x4c0] sm:$0xff]
  %v9469 = vld [vmem:[%s9315 + $0x4c8] sm:$0xff]
  %v9470 = vld [vmem:[%s9315 + $0x4d0] sm:$0xff]
  %v9471 = vld [vmem:[%s9315 + $0x4d8] sm:$0xff]
  %v9472 = vld [vmem:[%s9315 + $0x4e0] sm:$0xff]
  %v9473 = vld [vmem:[%s9315 + $0x4e8] sm:$0xff]
  %v9474 = vld [vmem:[%s9315 + $0x4f0] sm:$0xff]
  %v9475 = vld [vmem:[%s9315 + $0x4f8] sm:$0xff]
  %v9476 = vld [vmem:[%s9315 + $0x500] sm:$0xff]
  %v9477 = vld [vmem:[%s9315 + $0x508] sm:$0xff]
  %v9478 = vld [vmem:[%s9315 + $0x510] sm:$0xff]
  %v9479 = vld [vmem:[%s9315 + $0x518] sm:$0xff]
  %v9480 = vld [vmem:[%s9315 + $0x520] sm:$0xff]
  %v9481 = vld [vmem:[%s9315 + $0x528] sm:$0xff]
  %v9482 = vld [vmem:[%s9315 + $0x530] sm:$0xff]
  %v9483 = vld [vmem:[%s9315 + $0x538] sm:$0xff]
  %v9484 = vld [vmem:[%s9315 + $0x540] sm:$0xff]
  %v9485 = vld [vmem:[%s9315 + $0x548] sm:$0xff]
  %v9486 = vld [vmem:[%s9315 + $0x550] sm:$0xff]
  %v9487 = vld [vmem:[%s9315 + $0x558] sm:$0xff]
  %v9488 = vld [vmem:[%s9315 + $0x560] sm:$0xff]
  %v9489 = vld [vmem:[%s9315 + $0x568] sm:$0xff]
  %v9490 = vld [vmem:[%s9315 + $0x570] sm:$0xff]
  %v9491 = vld [vmem:[%s9315 + $0x578] sm:$0xff]
  %v9492 = vld [vmem:[%s9315 + $0x580] sm:$0xff]
  %v9493 = vld [vmem:[%s9315 + $0x588] sm:$0xff]
  %v9494 = vld [vmem:[%s9315 + $0x590] sm:$0xff]
  %v9495 = vld [vmem:[%s9315 + $0x598] sm:$0xff]
  %v9496 = vld [vmem:[%s9315 + $0x5a0] sm:$0xff]
  %v9497 = vld [vmem:[%s9315 + $0x5a8] sm:$0xff]
  %v9498 = vld [vmem:[%s9315 + $0x5b0] sm:$0xff]
  %v9499 = vld [vmem:[%s9315 + $0x5b8] sm:$0xff]
  %v9500 = vld [vmem:[%s9315 + $0x5c0] sm:$0xff]
  %v9501 = vld [vmem:[%s9315 + $0x5c8] sm:$0xff]
  %v9502 = vld [vmem:[%s9315 + $0x5d0] sm:$0xff]
  %v9503 = vld [vmem:[%s9315 + $0x5d8] sm:$0xff]
  %v9504 = vld [vmem:[%s9315 + $0x5e0] sm:$0xff]
  %v9505 = vld [vmem:[%s9315 + $0x5e8] sm:$0xff]
  %v9506 = vld [vmem:[%s9315 + $0x5f0] sm:$0xff]
  %v9507 = vld [vmem:[%s9315 + $0x5f8] sm:$0xff]
  %v9508 = vld [vmem:[%s9315 + $0x600] sm:$0xff]
  %v9509 = vld [vmem:[%s9315 + $0x608] sm:$0xff]
  %v9510 = vld [vmem:[%s9315 + $0x610] sm:$0xff]
  %v9511 = vld [vmem:[%s9315 + $0x618] sm:$0xff]
  %v9512 = vld [vmem:[%s9315 + $0x620] sm:$0xff]
  %v9513 = vld [vmem:[%s9315 + $0x628] sm:$0xff]
  %v9514 = vld [vmem:[%s9315 + $0x630] sm:$0xff]
  %v9515 = vld [vmem:[%s9315 + $0x638] sm:$0xff]
  %v9516 = vld [vmem:[%s9315 + $0x640] sm:$0xff]
  %v9517 = vld [vmem:[%s9315 + $0x648] sm:$0xff]
  %v9518 = vld [vmem:[%s9315 + $0x650] sm:$0xff]
  %v9519 = vld [vmem:[%s9315 + $0x658] sm:$0xff]
  %v9520 = vld [vmem:[%s9315 + $0x660] sm:$0xff]
  %v9521 = vld [vmem:[%s9315 + $0x668] sm:$0xff]
  %v9522 = vld [vmem:[%s9315 + $0x670] sm:$0xff]
  %v9523 = vld [vmem:[%s9315 + $0x678] sm:$0xff]
  %v9524 = vld [vmem:[%s9315 + $0x680] sm:$0xff]
  %v9525 = vld [vmem:[%s9315 + $0x688] sm:$0xff]
  %v9526 = vld [vmem:[%s9315 + $0x690] sm:$0xff]
  %v9527 = vld [vmem:[%s9315 + $0x698] sm:$0xff]
  %v9528 = vld [vmem:[%s9315 + $0x6a0] sm:$0xff]
  %v9529 = vld [vmem:[%s9315 + $0x6a8] sm:$0xff]
  %v9530 = vld [vmem:[%s9315 + $0x6b0] sm:$0xff]
  %v9531 = vld [vmem:[%s9315 + $0x6b8] sm:$0xff]
  %v9532 = vld [vmem:[%s9315 + $0x6c0] sm:$0xff]
  %v9533 = vld [vmem:[%s9315 + $0x6c8] sm:$0xff]
  %v9534 = vld [vmem:[%s9315 + $0x6d0] sm:$0xff]
  %v9535 = vld [vmem:[%s9315 + $0x6d8] sm:$0xff]
  %v9536 = vld [vmem:[%s9315 + $0x6e0] sm:$0xff]
  %v9537 = vld [vmem:[%s9315 + $0x6e8] sm:$0xff]
  %v9538 = vld [vmem:[%s9315 + $0x6f0] sm:$0xff]
  %v9539 = vld [vmem:[%s9315 + $0x6f8] sm:$0xff]
  %v9540 = vld [vmem:[%s9315 + $0x700] sm:$0xff]
  %v9541 = vld [vmem:[%s9315 + $0x708] sm:$0xff]
  %v9542 = vld [vmem:[%s9315 + $0x710] sm:$0xff]
  %v9543 = vld [vmem:[%s9315 + $0x718] sm:$0xff]
  %v9544 = vld [vmem:[%s9315 + $0x720] sm:$0xff]
  %v9545 = vld [vmem:[%s9315 + $0x728] sm:$0xff]
  %v9546 = vld [vmem:[%s9315 + $0x730] sm:$0xff]
  %v9547 = vld [vmem:[%s9315 + $0x738] sm:$0xff]
  %v9548 = vld [vmem:[%s9315 + $0x740] sm:$0xff]
  %v9549 = vld [vmem:[%s9315 + $0x748] sm:$0xff]
  %v9550 = vld [vmem:[%s9315 + $0x750] sm:$0xff]
  %v9551 = vld [vmem:[%s9315 + $0x758] sm:$0xff]
  %v9552 = vld [vmem:[%s9315 + $0x760] sm:$0xff]
  %v9553 = vld [vmem:[%s9315 + $0x768] sm:$0xff]
  %v9554 = vld [vmem:[%s9315 + $0x770] sm:$0xff]
  %v9555 = vld [vmem:[%s9315 + $0x778] sm:$0xff]
  %v9556 = vld [vmem:[%s9315 + $0x780] sm:$0xff]
  %v9557 = vld [vmem:[%s9315 + $0x788] sm:$0xff]
  %v9558 = vld [vmem:[%s9315 + $0x790] sm:$0xff]
  %v9559 = vld [vmem:[%s9315 + $0x798] sm:$0xff]
  %v9560 = vld [vmem:[%s9315 + $0x7a0] sm:$0xff]
  %v9561 = vld [vmem:[%s9315 + $0x7a8] sm:$0xff]
  %v9562 = vld [vmem:[%s9315 + $0x7b0] sm:$0xff]
  %v9563 = vld [vmem:[%s9315 + $0x7b8] sm:$0xff]
  %v9564 = vld [vmem:[%s9315 + $0x7c0] sm:$0xff]
  %v9565 = vld [vmem:[%s9315 + $0x7c8] sm:$0xff]
  %v9566 = vld [vmem:[%s9315 + $0x7d0] sm:$0xff]
  %v9567 = vld [vmem:[%s9315 + $0x7d8] sm:$0xff]
  %v9568 = vld [vmem:[%s9315 + $0x7e0] sm:$0xff]
  %v9569 = vld [vmem:[%s9315 + $0x7e8] sm:$0xff]
  %v9570 = vld [vmem:[%s9315 + $0x7f0] sm:$0xff]
  %v9571 = vld [vmem:[%s9315 + $0x7f8] sm:$0xff]
  %v9572 = vld [vmem:[%s9315 + $0x800] sm:$0xff]
  %v9573 = vld [vmem:[%s9315 + $0x808] sm:$0xff]
  %v9574 = vld [vmem:[%s9315 + $0x810] sm:$0xff]
  %v9575 = vld [vmem:[%s9315 + $0x818] sm:$0xff]
  %v9576 = vld [vmem:[%s9315 + $0x820] sm:$0xff]
  %v9577 = vld [vmem:[%s9315 + $0x828] sm:$0xff]
  %v9578 = vld [vmem:[%s9315 + $0x830] sm:$0xff]
  %v9579 = vld [vmem:[%s9315 + $0x838] sm:$0xff]
  %v9580 = vld [vmem:[%s9315 + $0x840] sm:$0xff]
  %v9581 = vld [vmem:[%s9315 + $0x848] sm:$0xff]
  %v9582 = vld [vmem:[%s9315 + $0x850] sm:$0xff]
  %v9583 = vld [vmem:[%s9315 + $0x858] sm:$0xff]
  %v9584 = vld [vmem:[%s9315 + $0x860] sm:$0xff]
  %v9585 = vld [vmem:[%s9315 + $0x868] sm:$0xff]
  %v9586 = vld [vmem:[%s9315 + $0x870] sm:$0xff]
  %v9587 = vld [vmem:[%s9315 + $0x878] sm:$0xff]
  %v9588 = vld [vmem:[%s9315 + $0x880] sm:$0xff]
  %v9589 = vld [vmem:[%s9315 + $0x888] sm:$0xff]
  %v9590 = vld [vmem:[%s9315 + $0x890] sm:$0xff]
  %v9591 = vld [vmem:[%s9315 + $0x898] sm:$0xff]
  %v9592 = vld [vmem:[%s9315 + $0x8a0] sm:$0xff]
  %v9593 = vld [vmem:[%s9315 + $0x8a8] sm:$0xff]
  %v9594 = vld [vmem:[%s9315 + $0x8b0] sm:$0xff]
  %v9595 = vld [vmem:[%s9315 + $0x8b8] sm:$0xff]
  %v9596 = vld [vmem:[%s9315 + $0x8c0] sm:$0xff]
  %v9597 = vld [vmem:[%s9315 + $0x8c8] sm:$0xff]
  %v9598 = vld [vmem:[%s9315 + $0x8d0] sm:$0xff]
  %v9599 = vld [vmem:[%s9315 + $0x8d8] sm:$0xff]
  %v9600 = vld [vmem:[%s9315 + $0x8e0] sm:$0xff]
  %v9601 = vld [vmem:[%s9315 + $0x8e8] sm:$0xff]
  %v9602 = vld [vmem:[%s9315 + $0x8f0] sm:$0xff]
  %v9603 = vld [vmem:[%s9315 + $0x8f8] sm:$0xff]
  %v9604 = vld [vmem:[%s9315 + $0x900] sm:$0xff]
  %v9605 = vld [vmem:[%s9315 + $0x908] sm:$0xff]
  %v9606 = vld [vmem:[%s9315 + $0x910] sm:$0xff]
  %v9607 = vld [vmem:[%s9315 + $0x918] sm:$0xff]
  %v9608 = vld [vmem:[%s9315 + $0x920] sm:$0xff]
  %v9609 = vld [vmem:[%s9315 + $0x928] sm:$0xff]
  %v9610 = vld [vmem:[%s9315 + $0x930] sm:$0xff]
  %v9611 = vld [vmem:[%s9315 + $0x938] sm:$0xff]
  %v9612 = vld [vmem:[%s9315 + $0x940] sm:$0xff]
  %v9613 = vld [vmem:[%s9315 + $0x948] sm:$0xff]
  %v9614 = vld [vmem:[%s9315 + $0x950] sm:$0xff]
  %v9615 = vld [vmem:[%s9315 + $0x958] sm:$0xff]
  %v9616 = vld [vmem:[%s9315 + $0x960] sm:$0xff]
  %v9617 = vld [vmem:[%s9315 + $0x968] sm:$0xff]
  %v9618 = vld [vmem:[%s9315 + $0x970] sm:$0xff]
  %v9619 = vld [vmem:[%s9315 + $0x978] sm:$0xff]
  %v9620 = vld [vmem:[%s9315 + $0x980] sm:$0xff]
  %v9621 = vld [vmem:[%s9315 + $0x988] sm:$0xff]
  %v9622 = vld [vmem:[%s9315 + $0x990] sm:$0xff]
  %v9623 = vld [vmem:[%s9315 + $0x998] sm:$0xff]
  %v9624 = vld [vmem:[%s9315 + $0x9a0] sm:$0xff]
  %v9625 = vld [vmem:[%s9315 + $0x9a8] sm:$0xff]
  %v9626 = vld [vmem:[%s9315 + $0x9b0] sm:$0xff]
  %v9627 = vld [vmem:[%s9315 + $0x9b8] sm:$0xff]
  %v9628 = vld [vmem:[%s9315 + $0x9c0] sm:$0xf]
  %v9629 = vld [vmem:[%s9315 + $0x9c8] sm:$0xf]
  %v9630 = vld [vmem:[%s9315 + $0x9d0] sm:$0xf]
  %v9631 = vld [vmem:[%s9315 + $0x9d8] sm:$0xf]
  %v9632 = vld [vmem:[%s9315 + $0x9e0] sm:$0xf]
  %v9633 = vld [vmem:[%s9315 + $0x9e8] sm:$0xf]
  %v9634 = vld [vmem:[%s9315 + $0x9f0] sm:$0xf]
  %v9635 = vld [vmem:[%s9315 + $0x9f8] sm:$0xf]
  %v9636 = vld [vmem:[%s9315 + $0xa00] sm:$0xf]
  %v9637 = vld [vmem:[%s9315 + $0xa08] sm:$0xf]
  %v9638 = vld [vmem:[%s9315 + $0xa10] sm:$0xf]
  %v9639 = vld [vmem:[%s9315 + $0xa18] sm:$0xf]
  %v9640 = vld [vmem:[%s9315 + $0xa20] sm:$0xf]
  %v9642 = vsel %vm6358, %v9314, 0
  %v9645 = vsel %vm5651, %v9628, 0
  %v9648 = vsel %vm5651, %v9629, 0
  %v9651 = vsel %vm5651, %v9630, 0
  %v9654 = vsel %vm5651, %v9631, 0
  %v9657 = vsel %vm5651, %v9632, 0
  %v9660 = vsel %vm5651, %v9633, 0
  %v9663 = vsel %vm5651, %v9634, 0
  %v9666 = vsel %vm5651, %v9635, 0
  %v9669 = vsel %vm5651, %v9636, 0
  %v9672 = vsel %vm5651, %v9637, 0
  %v9675 = vsel %vm5651, %v9638, 0
  %v9678 = vsel %vm5651, %v9639, 0
  %v9681 = vsel %vm5651, %v9640, 0
  %9683 = vmatprep.subr.mxu0 %v9512
  %9684 = vmatpush1.msra.mxu0 %v9511
  %9685 = vmatprep.subr.mxu0 %v9499
  %9686 = vmatpush1.msra.mxu0 %v9498
  %9687 = vmatprep.subr.mxu0 %v9486
  %9688 = vmatpush1.msra.mxu0 %v9485
  %9689 = vmatprep.subr.mxu0 %v9473
  %9690 = vmatpush1.msra.mxu0 %v9472
  %9691 = vmatprep.subr.mxu0 %v9460
  %9692 = vmatpush1.msra.mxu0 %v9459
  %9693 = vmatprep.subr.mxu0 %v9447
  %9694 = vmatpush1.msra.mxu0 %v9446
  %9695 = vmatprep.subr.mxu0 %v9434
  %9696 = vmatpush1.msra.mxu0 %v9433
  %9697 = vmatprep.subr.mxu0 %v9421
  %9698 = vmatpush1.msra.mxu0 %v9420
  %9699 = vmatprep.subr.mxu0 %v9408
  %9700 = vmatpush1.msra.mxu0 %v9407
  %9701 = vmatprep.subr.mxu0 %v9395
  %9702 = vmatpush1.msra.mxu0 %v9394
  %9703 = vmatprep.subr.mxu0 %v9382
  %9704 = vmatpush1.msra.mxu0 %v9381
  %9705 = vmatprep.subr.mxu0 %v9369
  %9706 = vmatpush1.msra.mxu0 %v9368
  %9707 = vmatprep.subr.mxu0 %v9356
  %9708 = vmatpush1.msra.mxu0 %v9355
  %9709 = vmatprep.subr.mxu0 %v9343
  %9710 = vmatpush1.msra.mxu0 %v9342
  %9711 = vmatprep.subr.mxu0 %v9330
  %9712 = vmatpush1.msra.mxu0 %v9329
  %9713 = vmatprep.subr.mxu0 %v9317
  %9714 = vmatpush1.msra.mxu0 %v9316
  %9715 = vmatprep.subr.mxu0 0.0
  %9716 = vmatpush2.msra.mxu0 0.0
  %9717 = vmatprep.subr.mxu0 0.0
  %9718 = vmatpush2.msra.mxu0 0.0
  %9719 = vmatprep.subr.mxu0 0.0
  %9720 = vmatpush2.msra.mxu0 0.0
  %9721 = vmatprep.subr.mxu0 0.0
  %9722 = vmatpush2.msra.mxu0 0.0
  %9723 = vmatprep.subr.mxu0 0.0
  %9724 = vmatpush2.msra.mxu0 0.0
  %9725 = vmatprep.subr.mxu0 0.0
  %9726 = vmatpush2.msra.mxu0 0.0
  %9727 = vmatprep.subr.mxu0 0.0
  %9728 = vmatpush2.msra.mxu0 0.0
  %9729 = vmatprep.subr.mxu0 %v9648
  %9730 = vmatpush2.msra.mxu0 %v9645
  %9731 = vmatprep.subr.mxu0 %v9616
  %9732 = vmatpush2.msra.mxu0 %v9615
  %9733 = vmatprep.subr.mxu0 %v9603
  %9734 = vmatpush2.msra.mxu0 %v9602
  %9735 = vmatprep.subr.mxu0 %v9590
  %9736 = vmatpush2.msra.mxu0 %v9589
  %9737 = vmatprep.subr.mxu0 %v9577
  %9738 = vmatpush2.msra.mxu0 %v9576
  %9739 = vmatprep.subr.mxu0 %v9564
  %9740 = vmatpush2.msra.mxu0 %v9563
  %9741 = vmatprep.subr.mxu0 %v9551
  %9742 = vmatpush2.msra.mxu0 %v9550
  %9743 = vmatprep.subr.mxu0 %v9538
  %9744 = vmatpush2.msra.mxu0 %v9537
  %9745 = vmatprep.subr.mxu0 %v9525
  %9746 = vmatpush2.msra.mxu0 %v9524
  %9747 = vmatprep.mubr.f32.mxu0 %v9642
  %9748 = vmatmul.mubr.f32.gmra.mxu0 %v9313
  %v9749 = vpop.f32.mrf.mxu0
  %v9750 = vadd.f32 0.0, %v9749
  %v9751 = vpop.f32.mrf.mxu0
  %v9752 = vadd.f32 0.0, %v9751
  %9753 = vdwg.mxu0
  %9754 = vmatprep.subr.mxu0 %v9514
  %9755 = vmatpush1.msra.mxu0 %v9513
  %9756 = vmatprep.subr.mxu0 %v9501
  %9757 = vmatpush1.msra.mxu0 %v9500
  %9758 = vmatprep.subr.mxu0 %v9488
  %9759 = vmatpush1.msra.mxu0 %v9487
  %9760 = vmatprep.subr.mxu0 %v9475
  %9761 = vmatpush1.msra.mxu0 %v9474
  %9762 = vmatprep.subr.mxu0 %v9462
  %9763 = vmatpush1.msra.mxu0 %v9461
  %9764 = vmatprep.subr.mxu0 %v9449
  %9765 = vmatpush1.msra.mxu0 %v9448
  %9766 = vmatprep.subr.mxu0 %v9436
  %9767 = vmatpush1.msra.mxu0 %v9435
  %9768 = vmatprep.subr.mxu0 %v9423
  %9769 = vmatpush1.msra.mxu0 %v9422
  %9770 = vmatprep.subr.mxu0 %v9410
  %9771 = vmatpush1.msra.mxu0 %v9409
  %9772 = vmatprep.subr.mxu0 %v9397
  %9773 = vmatpush1.msra.mxu0 %v9396
  %9774 = vmatprep.subr.mxu0 %v9384
  %9775 = vmatpush1.msra.mxu0 %v9383
  %9776 = vmatprep.subr.mxu0 %v9371
  %9777 = vmatpush1.msra.mxu0 %v9370
  %9778 = vmatprep.subr.mxu0 %v9358
  %9779 = vmatpush1.msra.mxu0 %v9357
  %9780 = vmatprep.subr.mxu0 %v9345
  %9781 = vmatpush1.msra.mxu0 %v9344
  %9782 = vmatprep.subr.mxu0 %v9332
  %9783 = vmatpush1.msra.mxu0 %v9331
  %9784 = vmatprep.subr.mxu0 %v9319
  %9785 = vmatpush1.msra.mxu0 %v9318
  %9786 = vmatprep.subr.mxu0 0.0
  %9787 = vmatpush2.msra.mxu0 0.0
  %9788 = vmatprep.subr.mxu0 0.0
  %9789 = vmatpush2.msra.mxu0 0.0
  %9790 = vmatprep.subr.mxu0 0.0
  %9791 = vmatpush2.msra.mxu0 0.0
  %9792 = vmatprep.subr.mxu0 0.0
  %9793 = vmatpush2.msra.mxu0 0.0
  %9794 = vmatprep.subr.mxu0 0.0
  %9795 = vmatpush2.msra.mxu0 0.0
  %9796 = vmatprep.subr.mxu0 0.0
  %9797 = vmatpush2.msra.mxu0 0.0
  %9798 = vmatprep.subr.mxu0 0.0
  %9799 = vmatpush2.msra.mxu0 0.0
  %9800 = vmatprep.subr.mxu0 %v9654
  %9801 = vmatpush2.msra.mxu0 %v9651
  %9802 = vmatprep.subr.mxu0 %v9618
  %9803 = vmatpush2.msra.mxu0 %v9617
  %9804 = vmatprep.subr.mxu0 %v9605
  %9805 = vmatpush2.msra.mxu0 %v9604
  %9806 = vmatprep.subr.mxu0 %v9592
  %9807 = vmatpush2.msra.mxu0 %v9591
  %9808 = vmatprep.subr.mxu0 %v9579
  %9809 = vmatpush2.msra.mxu0 %v9578
  %9810 = vmatprep.subr.mxu0 %v9566
  %9811 = vmatpush2.msra.mxu0 %v9565
  %9812 = vmatprep.subr.mxu0 %v9553
  %9813 = vmatpush2.msra.mxu0 %v9552
  %9814 = vmatprep.subr.mxu0 %v9540
  %9815 = vmatpush2.msra.mxu0 %v9539
  %9816 = vmatprep.subr.mxu0 %v9527
  %9817 = vmatpush2.msra.mxu0 %v9526
  %9818 = vmatprep.mubr.f32.mxu0 %v9642
  %9819 = vmatmul.mubr.f32.gmra.mxu0 %v9313
  %v9820 = vpop.f32.mrf.mxu0
  %v9821 = vadd.f32 0.0, %v9820
  %v9822 = vpop.f32.mrf.mxu0
  %v9823 = vadd.f32 0.0, %v9822
  %9824 = vdwg.mxu0
  %9825 = vmatprep.subr.mxu0 %v9516
  %9826 = vmatpush1.msra.mxu0 %v9515
  %9827 = vmatprep.subr.mxu0 %v9503
  %9828 = vmatpush1.msra.mxu0 %v9502
  %9829 = vmatprep.subr.mxu0 %v9490
  %9830 = vmatpush1.msra.mxu0 %v9489
  %9831 = vmatprep.subr.mxu0 %v9477
  %9832 = vmatpush1.msra.mxu0 %v9476
  %9833 = vmatprep.subr.mxu0 %v9464
  %9834 = vmatpush1.msra.mxu0 %v9463
  %9835 = vmatprep.subr.mxu0 %v9451
  %9836 = vmatpush1.msra.mxu0 %v9450
  %9837 = vmatprep.subr.mxu0 %v9438
  %9838 = vmatpush1.msra.mxu0 %v9437
  %9839 = vmatprep.subr.mxu0 %v9425
  %9840 = vmatpush1.msra.mxu0 %v9424
  %9841 = vmatprep.subr.mxu0 %v9412
  %9842 = vmatpush1.msra.mxu0 %v9411
  %9843 = vmatprep.subr.mxu0 %v9399
  %9844 = vmatpush1.msra.mxu0 %v9398
  %9845 = vmatprep.subr.mxu0 %v9386
  %9846 = vmatpush1.msra.mxu0 %v9385
  %9847 = vmatprep.subr.mxu0 %v9373
  %9848 = vmatpush1.msra.mxu0 %v9372
  %9849 = vmatprep.subr.mxu0 %v9360
  %9850 = vmatpush1.msra.mxu0 %v9359
  %9851 = vmatprep.subr.mxu0 %v9347
  %9852 = vmatpush1.msra.mxu0 %v9346
  %9853 = vmatprep.subr.mxu0 %v9334
  %9854 = vmatpush1.msra.mxu0 %v9333
  %9855 = vmatprep.subr.mxu0 %v9321
  %9856 = vmatpush1.msra.mxu0 %v9320
  %9857 = vmatprep.subr.mxu0 0.0
  %9858 = vmatpush2.msra.mxu0 0.0
  %9859 = vmatprep.subr.mxu0 0.0
  %9860 = vmatpush2.msra.mxu0 0.0
  %9861 = vmatprep.subr.mxu0 0.0
  %9862 = vmatpush2.msra.mxu0 0.0
  %9863 = vmatprep.subr.mxu0 0.0
  %9864 = vmatpush2.msra.mxu0 0.0
  %9865 = vmatprep.subr.mxu0 0.0
  %9866 = vmatpush2.msra.mxu0 0.0
  %9867 = vmatprep.subr.mxu0 0.0
  %9868 = vmatpush2.msra.mxu0 0.0
  %9869 = vmatprep.subr.mxu0 0.0
  %9870 = vmatpush2.msra.mxu0 0.0
  %9871 = vmatprep.subr.mxu0 %v9660
  %9872 = vmatpush2.msra.mxu0 %v9657
  %9873 = vmatprep.subr.mxu0 %v9620
  %9874 = vmatpush2.msra.mxu0 %v9619
  %9875 = vmatprep.subr.mxu0 %v9607
  %9876 = vmatpush2.msra.mxu0 %v9606
  %9877 = vmatprep.subr.mxu0 %v9594
  %9878 = vmatpush2.msra.mxu0 %v9593
  %9879 = vmatprep.subr.mxu0 %v9581
  %9880 = vmatpush2.msra.mxu0 %v9580
  %9881 = vmatprep.subr.mxu0 %v9568
  %9882 = vmatpush2.msra.mxu0 %v9567
  %9883 = vmatprep.subr.mxu0 %v9555
  %9884 = vmatpush2.msra.mxu0 %v9554
  %9885 = vmatprep.subr.mxu0 %v9542
  %9886 = vmatpush2.msra.mxu0 %v9541
  %9887 = vmatprep.subr.mxu0 %v9529
  %9888 = vmatpush2.msra.mxu0 %v9528
  %9889 = vmatprep.mubr.f32.mxu0 %v9642
  %9890 = vmatmul.mubr.f32.gmra.mxu0 %v9313
  %v9891 = vpop.f32.mrf.mxu0
  %v9892 = vadd.f32 0.0, %v9891
  %v9893 = vpop.f32.mrf.mxu0
  %v9894 = vadd.f32 0.0, %v9893
  %9895 = vdwg.mxu0
  %9896 = vmatprep.subr.mxu0 %v9518
  %9897 = vmatpush1.msra.mxu0 %v9517
  %9898 = vmatprep.subr.mxu0 %v9505
  %9899 = vmatpush1.msra.mxu0 %v9504
  %9900 = vmatprep.subr.mxu0 %v9492
  %9901 = vmatpush1.msra.mxu0 %v9491
  %9902 = vmatprep.subr.mxu0 %v9479
  %9903 = vmatpush1.msra.mxu0 %v9478
  %9904 = vmatprep.subr.mxu0 %v9466
  %9905 = vmatpush1.msra.mxu0 %v9465
  %9906 = vmatprep.subr.mxu0 %v9453
  %9907 = vmatpush1.msra.mxu0 %v9452
  %9908 = vmatprep.subr.mxu0 %v9440
  %9909 = vmatpush1.msra.mxu0 %v9439
  %9910 = vmatprep.subr.mxu0 %v9427
  %9911 = vmatpush1.msra.mxu0 %v9426
  %9912 = vmatprep.subr.mxu0 %v9414
  %9913 = vmatpush1.msra.mxu0 %v9413
  %9914 = vmatprep.subr.mxu0 %v9401
  %9915 = vmatpush1.msra.mxu0 %v9400
  %9916 = vmatprep.subr.mxu0 %v9388
  %9917 = vmatpush1.msra.mxu0 %v9387
  %9918 = vmatprep.subr.mxu0 %v9375
  %9919 = vmatpush1.msra.mxu0 %v9374
  %9920 = vmatprep.subr.mxu0 %v9362
  %9921 = vmatpush1.msra.mxu0 %v9361
  %9922 = vmatprep.subr.mxu0 %v9349
  %9923 = vmatpush1.msra.mxu0 %v9348
  %9924 = vmatprep.subr.mxu0 %v9336
  %9925 = vmatpush1.msra.mxu0 %v9335
  %9926 = vmatprep.subr.mxu0 %v9323
  %9927 = vmatpush1.msra.mxu0 %v9322
  %9928 = vmatprep.subr.mxu0 0.0
  %9929 = vmatpush2.msra.mxu0 0.0
  %9930 = vmatprep.subr.mxu0 0.0
  %9931 = vmatpush2.msra.mxu0 0.0
  %9932 = vmatprep.subr.mxu0 0.0
  %9933 = vmatpush2.msra.mxu0 0.0
  %9934 = vmatprep.subr.mxu0 0.0
  %9935 = vmatpush2.msra.mxu0 0.0
  %9936 = vmatprep.subr.mxu0 0.0
  %9937 = vmatpush2.msra.mxu0 0.0
  %9938 = vmatprep.subr.mxu0 0.0
  %9939 = vmatpush2.msra.mxu0 0.0
  %9940 = vmatprep.subr.mxu0 0.0
  %9941 = vmatpush2.msra.mxu0 0.0
  %9942 = vmatprep.subr.mxu0 %v9666
  %9943 = vmatpush2.msra.mxu0 %v9663
  %9944 = vmatprep.subr.mxu0 %v9622
  %9945 = vmatpush2.msra.mxu0 %v9621
  %9946 = vmatprep.subr.mxu0 %v9609
  %9947 = vmatpush2.msra.mxu0 %v9608
  %9948 = vmatprep.subr.mxu0 %v9596
  %9949 = vmatpush2.msra.mxu0 %v9595
  %9950 = vmatprep.subr.mxu0 %v9583
  %9951 = vmatpush2.msra.mxu0 %v9582
  %9952 = vmatprep.subr.mxu0 %v9570
  %9953 = vmatpush2.msra.mxu0 %v9569
  %9954 = vmatprep.subr.mxu0 %v9557
  %9955 = vmatpush2.msra.mxu0 %v9556
  %9956 = vmatprep.subr.mxu0 %v9544
  %9957 = vmatpush2.msra.mxu0 %v9543
  %9958 = vmatprep.subr.mxu0 %v9531
  %9959 = vmatpush2.msra.mxu0 %v9530
  %9960 = vmatprep.mubr.f32.mxu0 %v9642
  %9961 = vmatmul.mubr.f32.gmra.mxu0 %v9313
  %v9962 = vpop.f32.mrf.mxu0
  %v9963 = vadd.f32 0.0, %v9962
  %v9964 = vpop.f32.mrf.mxu0
  %v9965 = vadd.f32 0.0, %v9964
  %9966 = vdwg.mxu0
  %9967 = vmatprep.subr.mxu0 %v9520
  %9968 = vmatpush1.msra.mxu0 %v9519
  %9969 = vmatprep.subr.mxu0 %v9507
  %9970 = vmatpush1.msra.mxu0 %v9506
  %9971 = vmatprep.subr.mxu0 %v9494
  %9972 = vmatpush1.msra.mxu0 %v9493
  %9973 = vmatprep.subr.mxu0 %v9481
  %9974 = vmatpush1.msra.mxu0 %v9480
  %9975 = vmatprep.subr.mxu0 %v9468
  %9976 = vmatpush1.msra.mxu0 %v9467
  %9977 = vmatprep.subr.mxu0 %v9455
  %9978 = vmatpush1.msra.mxu0 %v9454
  %9979 = vmatprep.subr.mxu0 %v9442
  %9980 = vmatpush1.msra.mxu0 %v9441
  %9981 = vmatprep.subr.mxu0 %v9429
  %9982 = vmatpush1.msra.mxu0 %v9428
  %9983 = vmatprep.subr.mxu0 %v9416
  %9984 = vmatpush1.msra.mxu0 %v9415
  %9985 = vmatprep.subr.mxu0 %v9403
  %9986 = vmatpush1.msra.mxu0 %v9402
  %9987 = vmatprep.subr.mxu0 %v9390
  %9988 = vmatpush1.msra.mxu0 %v9389
  %9989 = vmatprep.subr.mxu0 %v9377
  %9990 = vmatpush1.msra.mxu0 %v9376
  %9991 = vmatprep.subr.mxu0 %v9364
  %9992 = vmatpush1.msra.mxu0 %v9363
  %9993 = vmatprep.subr.mxu0 %v9351
  %9994 = vmatpush1.msra.mxu0 %v9350
  %9995 = vmatprep.subr.mxu0 %v9338
  %9996 = vmatpush1.msra.mxu0 %v9337
  %9997 = vmatprep.subr.mxu0 %v9325
  %9998 = vmatpush1.msra.mxu0 %v9324
  %9999 = vmatprep.subr.mxu0 0.0
  %10000 = vmatpush2.msra.mxu0 0.0
  %10001 = vmatprep.subr.mxu0 0.0
  %10002 = vmatpush2.msra.mxu0 0.0
  %10003 = vmatprep.subr.mxu0 0.0
  %10004 = vmatpush2.msra.mxu0 0.0
  %10005 = vmatprep.subr.mxu0 0.0
  %10006 = vmatpush2.msra.mxu0 0.0
  %10007 = vmatprep.subr.mxu0 0.0
  %10008 = vmatpush2.msra.mxu0 0.0
  %10009 = vmatprep.subr.mxu0 0.0
  %10010 = vmatpush2.msra.mxu0 0.0
  %10011 = vmatprep.subr.mxu0 0.0
  %10012 = vmatpush2.msra.mxu0 0.0
  %10013 = vmatprep.subr.mxu0 %v9672
  %10014 = vmatpush2.msra.mxu0 %v9669
  %10015 = vmatprep.subr.mxu0 %v9624
  %10016 = vmatpush2.msra.mxu0 %v9623
  %10017 = vmatprep.subr.mxu0 %v9611
  %10018 = vmatpush2.msra.mxu0 %v9610
  %10019 = vmatprep.subr.mxu0 %v9598
  %10020 = vmatpush2.msra.mxu0 %v9597
  %10021 = vmatprep.subr.mxu0 %v9585
  %10022 = vmatpush2.msra.mxu0 %v9584
  %10023 = vmatprep.subr.mxu0 %v9572
  %10024 = vmatpush2.msra.mxu0 %v9571
  %10025 = vmatprep.subr.mxu0 %v9559
  %10026 = vmatpush2.msra.mxu0 %v9558
  %10027 = vmatprep.subr.mxu0 %v9546
  %10028 = vmatpush2.msra.mxu0 %v9545
  %10029 = vmatprep.subr.mxu0 %v9533
  %10030 = vmatpush2.msra.mxu0 %v9532
  %10031 = vmatprep.mubr.f32.mxu0 %v9642
  %10032 = vmatmul.mubr.f32.gmra.mxu0 %v9313
  %v10033 = vpop.f32.mrf.mxu0
  %v10034 = vadd.f32 0.0, %v10033
  %v10035 = vpop.f32.mrf.mxu0
  %v10036 = vadd.f32 0.0, %v10035
  %10037 = vdwg.mxu0
  %10038 = vmatprep.subr.mxu0 %v9522
  %10039 = vmatpush1.msra.mxu0 %v9521
  %10040 = vmatprep.subr.mxu0 %v9509
  %10041 = vmatpush1.msra.mxu0 %v9508
  %10042 = vmatprep.subr.mxu0 %v9496
  %10043 = vmatpush1.msra.mxu0 %v9495
  %10044 = vmatprep.subr.mxu0 %v9483
  %10045 = vmatpush1.msra.mxu0 %v9482
  %10046 = vmatprep.subr.mxu0 %v9470
  %10047 = vmatpush1.msra.mxu0 %v9469
  %10048 = vmatprep.subr.mxu0 %v9457
  %10049 = vmatpush1.msra.mxu0 %v9456
  %10050 = vmatprep.subr.mxu0 %v9444
  %10051 = vmatpush1.msra.mxu0 %v9443
  %10052 = vmatprep.subr.mxu0 %v9431
  %10053 = vmatpush1.msra.mxu0 %v9430
  %10054 = vmatprep.subr.mxu0 %v9418
  %10055 = vmatpush1.msra.mxu0 %v9417
  %10056 = vmatprep.subr.mxu0 %v9405
  %10057 = vmatpush1.msra.mxu0 %v9404
  %10058 = vmatprep.subr.mxu0 %v9392
  %10059 = vmatpush1.msra.mxu0 %v9391
  %10060 = vmatprep.subr.mxu0 %v9379
  %10061 = vmatpush1.msra.mxu0 %v9378
  %10062 = vmatprep.subr.mxu0 %v9366
  %10063 = vmatpush1.msra.mxu0 %v9365
  %10064 = vmatprep.subr.mxu0 %v9353
  %10065 = vmatpush1.msra.mxu0 %v9352
  %10066 = vmatprep.subr.mxu0 %v9340
  %10067 = vmatpush1.msra.mxu0 %v9339
  %10068 = vmatprep.subr.mxu0 %v9327
  %10069 = vmatpush1.msra.mxu0 %v9326
  %10070 = vmatprep.subr.mxu0 0.0
  %10071 = vmatpush2.msra.mxu0 0.0
  %10072 = vmatprep.subr.mxu0 0.0
  %10073 = vmatpush2.msra.mxu0 0.0
  %10074 = vmatprep.subr.mxu0 0.0
  %10075 = vmatpush2.msra.mxu0 0.0
  %10076 = vmatprep.subr.mxu0 0.0
  %10077 = vmatpush2.msra.mxu0 0.0
  %10078 = vmatprep.subr.mxu0 0.0
  %10079 = vmatpush2.msra.mxu0 0.0
  %10080 = vmatprep.subr.mxu0 0.0
  %10081 = vmatpush2.msra.mxu0 0.0
  %10082 = vmatprep.subr.mxu0 0.0
  %10083 = vmatpush2.msra.mxu0 0.0
  %10084 = vmatprep.subr.mxu0 %v9678
  %10085 = vmatpush2.msra.mxu0 %v9675
  %10086 = vmatprep.subr.mxu0 %v9626
  %10087 = vmatpush2.msra.mxu0 %v9625
  %10088 = vmatprep.subr.mxu0 %v9613
  %10089 = vmatpush2.msra.mxu0 %v9612
  %10090 = vmatprep.subr.mxu0 %v9600
  %10091 = vmatpush2.msra.mxu0 %v9599
  %10092 = vmatprep.subr.mxu0 %v9587
  %10093 = vmatpush2.msra.mxu0 %v9586
  %10094 = vmatprep.subr.mxu0 %v9574
  %10095 = vmatpush2.msra.mxu0 %v9573
  %10096 = vmatprep.subr.mxu0 %v9561
  %10097 = vmatpush2.msra.mxu0 %v9560
  %10098 = vmatprep.subr.mxu0 %v9548
  %10099 = vmatpush2.msra.mxu0 %v9547
  %10100 = vmatprep.subr.mxu0 %v9535
  %10101 = vmatpush2.msra.mxu0 %v9534
  %10102 = vmatprep.mubr.f32.mxu0 %v9642
  %10103 = vmatmul.mubr.f32.gmra.mxu0 %v9313
  %v10104 = vpop.f32.mrf.mxu0
  %v10105 = vadd.f32 0.0, %v10104
  %v10106 = vpop.f32.mrf.mxu0
  %v10107 = vadd.f32 0.0, %v10106
  %10108 = vdwg.mxu0
  %10109 = vmatprep.subr.mxu0 0.0
  %10110 = vmatpush1.msra.mxu0 %v9523
  %10111 = vmatprep.subr.mxu0 0.0
  %10112 = vmatpush1.msra.mxu0 %v9510
  %10113 = vmatprep.subr.mxu0 0.0
  %10114 = vmatpush1.msra.mxu0 %v9497
  %10115 = vmatprep.subr.mxu0 0.0
  %10116 = vmatpush1.msra.mxu0 %v9484
  %10117 = vmatprep.subr.mxu0 0.0
  %10118 = vmatpush1.msra.mxu0 %v9471
  %10119 = vmatprep.subr.mxu0 0.0
  %10120 = vmatpush1.msra.mxu0 %v9458
  %10121 = vmatprep.subr.mxu0 0.0
  %10122 = vmatpush1.msra.mxu0 %v9445
  %10123 = vmatprep.subr.mxu0 0.0
  %10124 = vmatpush1.msra.mxu0 %v9432
  %10125 = vmatprep.subr.mxu0 0.0
  %10126 = vmatpush1.msra.mxu0 %v9419
  %10127 = vmatprep.subr.mxu0 0.0
  %10128 = vmatpush1.msra.mxu0 %v9406
  %10129 = vmatprep.subr.mxu0 0.0
  %10130 = vmatpush1.msra.mxu0 %v9393
  %10131 = vmatprep.subr.mxu0 0.0
  %10132 = vmatpush1.msra.mxu0 %v9380
  %10133 = vmatprep.subr.mxu0 0.0
  %10134 = vmatpush1.msra.mxu0 %v9367
  %10135 = vmatprep.subr.mxu0 0.0
  %10136 = vmatpush1.msra.mxu0 %v9354
  %10137 = vmatprep.subr.mxu0 0.0
  %10138 = vmatpush1.msra.mxu0 %v9341
  %10139 = vmatprep.subr.mxu0 0.0
  %10140 = vmatpush1.msra.mxu0 %v9328
  %10141 = vmatprep.subr.mxu0 0.0
  %10142 = vmatpush2.msra.mxu0 0.0
  %10143 = vmatprep.subr.mxu0 0.0
  %10144 = vmatpush2.msra.mxu0 0.0
  %10145 = vmatprep.subr.mxu0 0.0
  %10146 = vmatpush2.msra.mxu0 0.0
  %10147 = vmatprep.subr.mxu0 0.0
  %10148 = vmatpush2.msra.mxu0 0.0
  %10149 = vmatprep.subr.mxu0 0.0
  %10150 = vmatpush2.msra.mxu0 0.0
  %10151 = vmatprep.subr.mxu0 0.0
  %10152 = vmatpush2.msra.mxu0 0.0
  %10153 = vmatprep.subr.mxu0 0.0
  %10154 = vmatpush2.msra.mxu0 0.0
  %10155 = vmatprep.subr.mxu0 0.0
  %10156 = vmatpush2.msra.mxu0 %v9681
  %10157 = vmatprep.subr.mxu0 0.0
  %10158 = vmatpush2.msra.mxu0 %v9627
  %10159 = vmatprep.subr.mxu0 0.0
  %10160 = vmatpush2.msra.mxu0 %v9614
  %10161 = vmatprep.subr.mxu0 0.0
  %10162 = vmatpush2.msra.mxu0 %v9601
  %10163 = vmatprep.subr.mxu0 0.0
  %10164 = vmatpush2.msra.mxu0 %v9588
  %10165 = vmatprep.subr.mxu0 0.0
  %10166 = vmatpush2.msra.mxu0 %v9575
  %10167 = vmatprep.subr.mxu0 0.0
  %10168 = vmatpush2.msra.mxu0 %v9562
  %10169 = vmatprep.subr.mxu0 0.0
  %10170 = vmatpush2.msra.mxu0 %v9549
  %10171 = vmatprep.subr.mxu0 0.0
  %10172 = vmatpush2.msra.mxu0 %v9536
  %10173 = vmatprep.mubr.f32.mxu0 %v9642
  %10174 = vmatmul.mubr.f32.gmra.mxu0 %v9313
  %v10175 = vpop.f32.mrf.mxu0
  %v10176 = vadd.f32 0.0, %v10175
  %v10177 = vpop.f32.mrf.mxu0
  %10178 = vdwg.mxu0
  %v10179 = vadd.f32 %v9260, %v9750
  %v10180 = vadd.f32 %v9261, %v9752
  %v10181 = vadd.f32 %v9262, %v9821
  %v10182 = vadd.f32 %v9263, %v9823
  %v10183 = vadd.f32 %v9264, %v9892
  %v10184 = vadd.f32 %v9265, %v9894
  %v10185 = vadd.f32 %v9266, %v9963
  %v10186 = vadd.f32 %v9267, %v9965
  %v10187 = vadd.f32 %v9268, %v10034
  %v10188 = vadd.f32 %v9269, %v10036
  %v10189 = vadd.f32 %v9270, %v10105
  %v10190 = vadd.f32 %v9271, %v10107
  %v10191 = vadd.f32 %v9272, %v10176
  %v10192 = vrot.slane %v914, 5
  %v10193 = vrot.slane %v916, 5
  %v10196 = vrot.slane %v1583, 4
  %v10197 = vrot.slane %v1585, 4
  %v10200 = vrot.slane %v2252, 3
  %v10201 = vrot.slane %v2254, 3
  %v10204 = vrot.slane %v2921, 2
  %v10205 = vrot.slane %v2923, 2
  %v10208 = vrot.slane %v3590, 1
  %v10209 = vrot.slane %v3592, 1
  %v10212 = vrot.slane %v4928, 7
  %v10213 = vrot.slane %v4930, 7
  %v10216 = vrot.slane %v5597, 6
  %v10217 = vrot.slane %v5599, 6
  %v10220 = vsel %vm5643, %v10192, %v10196
  %v10221 = vsel %vm5643, %v10193, %v10197
  %v10222 = vsel %vm5646, %v10220, %v10200
  %v10223 = vsel %vm5646, %v10221, %v10201
  %v10224 = vsel %vm318, %v10222, %v10204
  %v10225 = vsel %vm318, %v10223, %v10205
  %v10226 = vsel %vm5651, %v10224, %v10208
  %v10227 = vsel %vm5651, %v10225, %v10209
  %v10228 = vsel %vm5654, %v10226, %v4259
  %v10229 = vsel %vm5654, %v10227, %v4261
  %v10230 = vsel %vm5657, %v10228, %v10212
  %v10231 = vsel %vm5657, %v10229, %v10213
  %v10232 = vsel %vm5660, %v10230, %v10216
  %v10233 = vsel %vm5660, %v10231, %v10217
  %s10234 = scalar_lea.vmem %s4, 13000
  %v10235 = vld [vmem:[%s10234] sm:$0xff]
  %v10236 = vld [vmem:[%s10234 + $0x8] sm:$0xff]
  %v10237 = vld [vmem:[%s10234 + $0x10] sm:$0xff]
  %v10238 = vld [vmem:[%s10234 + $0x18] sm:$0xff]
  %v10239 = vld [vmem:[%s10234 + $0x20] sm:$0xff]
  %v10240 = vld [vmem:[%s10234 + $0x28] sm:$0xff]
  %v10241 = vld [vmem:[%s10234 + $0x30] sm:$0xff]
  %v10242 = vld [vmem:[%s10234 + $0x38] sm:$0xff]
  %v10243 = vld [vmem:[%s10234 + $0x40] sm:$0xff]
  %v10244 = vld [vmem:[%s10234 + $0x48] sm:$0xff]
  %v10245 = vld [vmem:[%s10234 + $0x50] sm:$0xff]
  %v10246 = vld [vmem:[%s10234 + $0x58] sm:$0xff]
  %v10247 = vld [vmem:[%s10234 + $0x60] sm:$0xff]
  %v10248 = vld [vmem:[%s10234 + $0x68] sm:$0xff]
  %v10249 = vld [vmem:[%s10234 + $0x70] sm:$0xff]
  %v10250 = vld [vmem:[%s10234 + $0x78] sm:$0xff]
  %v10251 = vld [vmem:[%s10234 + $0x80] sm:$0xff]
  %v10252 = vld [vmem:[%s10234 + $0x88] sm:$0xff]
  %v10253 = vld [vmem:[%s10234 + $0x90] sm:$0xff]
  %v10254 = vld [vmem:[%s10234 + $0x98] sm:$0xff]
  %v10255 = vld [vmem:[%s10234 + $0xa0] sm:$0xff]
  %v10256 = vld [vmem:[%s10234 + $0xa8] sm:$0xff]
  %v10257 = vld [vmem:[%s10234 + $0xb0] sm:$0xff]
  %v10258 = vld [vmem:[%s10234 + $0xb8] sm:$0xff]
  %v10259 = vld [vmem:[%s10234 + $0xc0] sm:$0xff]
  %v10260 = vld [vmem:[%s10234 + $0xc8] sm:$0xff]
  %v10261 = vld [vmem:[%s10234 + $0xd0] sm:$0xff]
  %v10262 = vld [vmem:[%s10234 + $0xd8] sm:$0xff]
  %v10263 = vld [vmem:[%s10234 + $0xe0] sm:$0xff]
  %v10264 = vld [vmem:[%s10234 + $0xe8] sm:$0xff]
  %v10265 = vld [vmem:[%s10234 + $0xf0] sm:$0xff]
  %v10266 = vld [vmem:[%s10234 + $0xf8] sm:$0xff]
  %v10267 = vld [vmem:[%s10234 + $0x100] sm:$0xff]
  %v10268 = vld [vmem:[%s10234 + $0x108] sm:$0xff]
  %v10269 = vld [vmem:[%s10234 + $0x110] sm:$0xff]
  %v10270 = vld [vmem:[%s10234 + $0x118] sm:$0xff]
  %v10271 = vld [vmem:[%s10234 + $0x120] sm:$0xff]
  %v10272 = vld [vmem:[%s10234 + $0x128] sm:$0xff]
  %v10273 = vld [vmem:[%s10234 + $0x130] sm:$0xff]
  %v10274 = vld [vmem:[%s10234 + $0x138] sm:$0xff]
  %v10275 = vld [vmem:[%s10234 + $0x140] sm:$0xff]
  %v10276 = vld [vmem:[%s10234 + $0x148] sm:$0xff]
  %v10277 = vld [vmem:[%s10234 + $0x150] sm:$0xff]
  %v10278 = vld [vmem:[%s10234 + $0x158] sm:$0xff]
  %v10279 = vld [vmem:[%s10234 + $0x160] sm:$0xff]
  %v10280 = vld [vmem:[%s10234 + $0x168] sm:$0xff]
  %v10281 = vld [vmem:[%s10234 + $0x170] sm:$0xff]
  %v10282 = vld [vmem:[%s10234 + $0x178] sm:$0xff]
  %v10283 = vld [vmem:[%s10234 + $0x180] sm:$0xff]
  %v10284 = vld [vmem:[%s10234 + $0x188] sm:$0xff]
  %v10285 = vld [vmem:[%s10234 + $0x190] sm:$0xff]
  %v10286 = vld [vmem:[%s10234 + $0x198] sm:$0xff]
  %v10287 = vld [vmem:[%s10234 + $0x1a0] sm:$0xff]
  %v10288 = vld [vmem:[%s10234 + $0x1a8] sm:$0xff]
  %v10289 = vld [vmem:[%s10234 + $0x1b0] sm:$0xff]
  %v10290 = vld [vmem:[%s10234 + $0x1b8] sm:$0xff]
  %v10291 = vld [vmem:[%s10234 + $0x1c0] sm:$0xff]
  %v10292 = vld [vmem:[%s10234 + $0x1c8] sm:$0xff]
  %v10293 = vld [vmem:[%s10234 + $0x1d0] sm:$0xff]
  %v10294 = vld [vmem:[%s10234 + $0x1d8] sm:$0xff]
  %v10295 = vld [vmem:[%s10234 + $0x1e0] sm:$0xff]
  %v10296 = vld [vmem:[%s10234 + $0x1e8] sm:$0xff]
  %v10297 = vld [vmem:[%s10234 + $0x1f0] sm:$0xff]
  %v10298 = vld [vmem:[%s10234 + $0x1f8] sm:$0xff]
  %v10299 = vld [vmem:[%s10234 + $0x200] sm:$0xff]
  %v10300 = vld [vmem:[%s10234 + $0x208] sm:$0xff]
  %v10301 = vld [vmem:[%s10234 + $0x210] sm:$0xff]
  %v10302 = vld [vmem:[%s10234 + $0x218] sm:$0xff]
  %v10303 = vld [vmem:[%s10234 + $0x220] sm:$0xff]
  %v10304 = vld [vmem:[%s10234 + $0x228] sm:$0xff]
  %v10305 = vld [vmem:[%s10234 + $0x230] sm:$0xff]
  %v10306 = vld [vmem:[%s10234 + $0x238] sm:$0xff]
  %v10307 = vld [vmem:[%s10234 + $0x240] sm:$0xff]
  %v10308 = vld [vmem:[%s10234 + $0x248] sm:$0xff]
  %v10309 = vld [vmem:[%s10234 + $0x250] sm:$0xff]
  %v10310 = vld [vmem:[%s10234 + $0x258] sm:$0xff]
  %v10311 = vld [vmem:[%s10234 + $0x260] sm:$0xff]
  %v10312 = vld [vmem:[%s10234 + $0x268] sm:$0xff]
  %v10313 = vld [vmem:[%s10234 + $0x270] sm:$0xff]
  %v10314 = vld [vmem:[%s10234 + $0x278] sm:$0xff]
  %v10315 = vld [vmem:[%s10234 + $0x280] sm:$0xff]
  %v10316 = vld [vmem:[%s10234 + $0x288] sm:$0xff]
  %v10317 = vld [vmem:[%s10234 + $0x290] sm:$0xff]
  %v10318 = vld [vmem:[%s10234 + $0x298] sm:$0xff]
  %v10319 = vld [vmem:[%s10234 + $0x2a0] sm:$0xff]
  %v10320 = vld [vmem:[%s10234 + $0x2a8] sm:$0xff]
  %v10321 = vld [vmem:[%s10234 + $0x2b0] sm:$0xff]
  %v10322 = vld [vmem:[%s10234 + $0x2b8] sm:$0xff]
  %v10323 = vld [vmem:[%s10234 + $0x2c0] sm:$0xff]
  %v10324 = vld [vmem:[%s10234 + $0x2c8] sm:$0xff]
  %v10325 = vld [vmem:[%s10234 + $0x2d0] sm:$0xff]
  %v10326 = vld [vmem:[%s10234 + $0x2d8] sm:$0xff]
  %v10327 = vld [vmem:[%s10234 + $0x2e0] sm:$0xff]
  %v10328 = vld [vmem:[%s10234 + $0x2e8] sm:$0xff]
  %v10329 = vld [vmem:[%s10234 + $0x2f0] sm:$0xff]
  %v10330 = vld [vmem:[%s10234 + $0x2f8] sm:$0xff]
  %v10331 = vld [vmem:[%s10234 + $0x300] sm:$0xff]
  %v10332 = vld [vmem:[%s10234 + $0x308] sm:$0xff]
  %v10333 = vld [vmem:[%s10234 + $0x310] sm:$0xff]
  %v10334 = vld [vmem:[%s10234 + $0x318] sm:$0xff]
  %v10335 = vld [vmem:[%s10234 + $0x320] sm:$0xff]
  %v10336 = vld [vmem:[%s10234 + $0x328] sm:$0xff]
  %v10337 = vld [vmem:[%s10234 + $0x330] sm:$0xff]
  %v10338 = vld [vmem:[%s10234 + $0x338] sm:$0xff]
  %v10339 = vld [vmem:[%s10234 + $0x340] sm:$0xff]
  %v10340 = vld [vmem:[%s10234 + $0x348] sm:$0xff]
  %v10341 = vld [vmem:[%s10234 + $0x350] sm:$0xff]
  %v10342 = vld [vmem:[%s10234 + $0x358] sm:$0xff]
  %v10343 = vld [vmem:[%s10234 + $0x360] sm:$0xff]
  %v10344 = vld [vmem:[%s10234 + $0x368] sm:$0xff]
  %v10345 = vld [vmem:[%s10234 + $0x370] sm:$0xff]
  %v10346 = vld [vmem:[%s10234 + $0x378] sm:$0xff]
  %v10347 = vld [vmem:[%s10234 + $0x380] sm:$0xff]
  %v10348 = vld [vmem:[%s10234 + $0x388] sm:$0xff]
  %v10349 = vld [vmem:[%s10234 + $0x390] sm:$0xff]
  %v10350 = vld [vmem:[%s10234 + $0x398] sm:$0xff]
  %v10351 = vld [vmem:[%s10234 + $0x3a0] sm:$0xff]
  %v10352 = vld [vmem:[%s10234 + $0x3a8] sm:$0xff]
  %v10353 = vld [vmem:[%s10234 + $0x3b0] sm:$0xff]
  %v10354 = vld [vmem:[%s10234 + $0x3b8] sm:$0xff]
  %v10355 = vld [vmem:[%s10234 + $0x3c0] sm:$0xff]
  %v10356 = vld [vmem:[%s10234 + $0x3c8] sm:$0xff]
  %v10357 = vld [vmem:[%s10234 + $0x3d0] sm:$0xff]
  %v10358 = vld [vmem:[%s10234 + $0x3d8] sm:$0xff]
  %v10359 = vld [vmem:[%s10234 + $0x3e0] sm:$0xff]
  %v10360 = vld [vmem:[%s10234 + $0x3e8] sm:$0xff]
  %v10361 = vld [vmem:[%s10234 + $0x3f0] sm:$0xff]
  %v10362 = vld [vmem:[%s10234 + $0x3f8] sm:$0xff]
  %v10363 = vld [vmem:[%s10234 + $0x400] sm:$0xff]
  %v10364 = vld [vmem:[%s10234 + $0x408] sm:$0xff]
  %v10365 = vld [vmem:[%s10234 + $0x410] sm:$0xff]
  %v10366 = vld [vmem:[%s10234 + $0x418] sm:$0xff]
  %v10367 = vld [vmem:[%s10234 + $0x420] sm:$0xff]
  %v10368 = vld [vmem:[%s10234 + $0x428] sm:$0xff]
  %v10369 = vld [vmem:[%s10234 + $0x430] sm:$0xff]
  %v10370 = vld [vmem:[%s10234 + $0x438] sm:$0xff]
  %v10371 = vld [vmem:[%s10234 + $0x440] sm:$0xff]
  %v10372 = vld [vmem:[%s10234 + $0x448] sm:$0xff]
  %v10373 = vld [vmem:[%s10234 + $0x450] sm:$0xff]
  %v10374 = vld [vmem:[%s10234 + $0x458] sm:$0xff]
  %v10375 = vld [vmem:[%s10234 + $0x460] sm:$0xff]
  %v10376 = vld [vmem:[%s10234 + $0x468] sm:$0xff]
  %v10377 = vld [vmem:[%s10234 + $0x470] sm:$0xff]
  %v10378 = vld [vmem:[%s10234 + $0x478] sm:$0xff]
  %v10379 = vld [vmem:[%s10234 + $0x480] sm:$0xff]
  %v10380 = vld [vmem:[%s10234 + $0x488] sm:$0xff]
  %v10381 = vld [vmem:[%s10234 + $0x490] sm:$0xff]
  %v10382 = vld [vmem:[%s10234 + $0x498] sm:$0xff]
  %v10383 = vld [vmem:[%s10234 + $0x4a0] sm:$0xff]
  %v10384 = vld [vmem:[%s10234 + $0x4a8] sm:$0xff]
  %v10385 = vld [vmem:[%s10234 + $0x4b0] sm:$0xff]
  %v10386 = vld [vmem:[%s10234 + $0x4b8] sm:$0xff]
  %v10387 = vld [vmem:[%s10234 + $0x4c0] sm:$0xff]
  %v10388 = vld [vmem:[%s10234 + $0x4c8] sm:$0xff]
  %v10389 = vld [vmem:[%s10234 + $0x4d0] sm:$0xff]
  %v10390 = vld [vmem:[%s10234 + $0x4d8] sm:$0xff]
  %v10391 = vld [vmem:[%s10234 + $0x4e0] sm:$0xff]
  %v10392 = vld [vmem:[%s10234 + $0x4e8] sm:$0xff]
  %v10393 = vld [vmem:[%s10234 + $0x4f0] sm:$0xff]
  %v10394 = vld [vmem:[%s10234 + $0x4f8] sm:$0xff]
  %v10395 = vld [vmem:[%s10234 + $0x500] sm:$0xff]
  %v10396 = vld [vmem:[%s10234 + $0x508] sm:$0xff]
  %v10397 = vld [vmem:[%s10234 + $0x510] sm:$0xff]
  %v10398 = vld [vmem:[%s10234 + $0x518] sm:$0xff]
  %v10399 = vld [vmem:[%s10234 + $0x520] sm:$0xff]
  %v10400 = vld [vmem:[%s10234 + $0x528] sm:$0xff]
  %v10401 = vld [vmem:[%s10234 + $0x530] sm:$0xff]
  %v10402 = vld [vmem:[%s10234 + $0x538] sm:$0xff]
  %v10403 = vld [vmem:[%s10234 + $0x540] sm:$0xff]
  %v10404 = vld [vmem:[%s10234 + $0x548] sm:$0xff]
  %v10405 = vld [vmem:[%s10234 + $0x550] sm:$0xff]
  %v10406 = vld [vmem:[%s10234 + $0x558] sm:$0xff]
  %v10407 = vld [vmem:[%s10234 + $0x560] sm:$0xff]
  %v10408 = vld [vmem:[%s10234 + $0x568] sm:$0xff]
  %v10409 = vld [vmem:[%s10234 + $0x570] sm:$0xff]
  %v10410 = vld [vmem:[%s10234 + $0x578] sm:$0xff]
  %v10411 = vld [vmem:[%s10234 + $0x580] sm:$0xff]
  %v10412 = vld [vmem:[%s10234 + $0x588] sm:$0xff]
  %v10413 = vld [vmem:[%s10234 + $0x590] sm:$0xff]
  %v10414 = vld [vmem:[%s10234 + $0x598] sm:$0xff]
  %v10415 = vld [vmem:[%s10234 + $0x5a0] sm:$0xff]
  %v10416 = vld [vmem:[%s10234 + $0x5a8] sm:$0xff]
  %v10417 = vld [vmem:[%s10234 + $0x5b0] sm:$0xff]
  %v10418 = vld [vmem:[%s10234 + $0x5b8] sm:$0xff]
  %v10419 = vld [vmem:[%s10234 + $0x5c0] sm:$0xff]
  %v10420 = vld [vmem:[%s10234 + $0x5c8] sm:$0xff]
  %v10421 = vld [vmem:[%s10234 + $0x5d0] sm:$0xff]
  %v10422 = vld [vmem:[%s10234 + $0x5d8] sm:$0xff]
  %v10423 = vld [vmem:[%s10234 + $0x5e0] sm:$0xff]
  %v10424 = vld [vmem:[%s10234 + $0x5e8] sm:$0xff]
  %v10425 = vld [vmem:[%s10234 + $0x5f0] sm:$0xff]
  %v10426 = vld [vmem:[%s10234 + $0x5f8] sm:$0xff]
  %v10427 = vld [vmem:[%s10234 + $0x600] sm:$0xff]
  %v10428 = vld [vmem:[%s10234 + $0x608] sm:$0xff]
  %v10429 = vld [vmem:[%s10234 + $0x610] sm:$0xff]
  %v10430 = vld [vmem:[%s10234 + $0x618] sm:$0xff]
  %v10431 = vld [vmem:[%s10234 + $0x620] sm:$0xff]
  %v10432 = vld [vmem:[%s10234 + $0x628] sm:$0xff]
  %v10433 = vld [vmem:[%s10234 + $0x630] sm:$0xff]
  %v10434 = vld [vmem:[%s10234 + $0x638] sm:$0xff]
  %v10435 = vld [vmem:[%s10234 + $0x640] sm:$0xff]
  %v10436 = vld [vmem:[%s10234 + $0x648] sm:$0xff]
  %v10437 = vld [vmem:[%s10234 + $0x650] sm:$0xff]
  %v10438 = vld [vmem:[%s10234 + $0x658] sm:$0xff]
  %v10439 = vld [vmem:[%s10234 + $0x660] sm:$0xff]
  %v10440 = vld [vmem:[%s10234 + $0x668] sm:$0xff]
  %v10441 = vld [vmem:[%s10234 + $0x670] sm:$0xff]
  %v10442 = vld [vmem:[%s10234 + $0x678] sm:$0xff]
  %v10443 = vld [vmem:[%s10234 + $0x680] sm:$0xff]
  %v10444 = vld [vmem:[%s10234 + $0x688] sm:$0xff]
  %v10445 = vld [vmem:[%s10234 + $0x690] sm:$0xff]
  %v10446 = vld [vmem:[%s10234 + $0x698] sm:$0xff]
  %v10447 = vld [vmem:[%s10234 + $0x6a0] sm:$0xff]
  %v10448 = vld [vmem:[%s10234 + $0x6a8] sm:$0xff]
  %v10449 = vld [vmem:[%s10234 + $0x6b0] sm:$0xff]
  %v10450 = vld [vmem:[%s10234 + $0x6b8] sm:$0xff]
  %v10451 = vld [vmem:[%s10234 + $0x6c0] sm:$0xff]
  %v10452 = vld [vmem:[%s10234 + $0x6c8] sm:$0xff]
  %v10453 = vld [vmem:[%s10234 + $0x6d0] sm:$0xff]
  %v10454 = vld [vmem:[%s10234 + $0x6d8] sm:$0xff]
  %v10455 = vld [vmem:[%s10234 + $0x6e0] sm:$0xff]
  %v10456 = vld [vmem:[%s10234 + $0x6e8] sm:$0xff]
  %v10457 = vld [vmem:[%s10234 + $0x6f0] sm:$0xff]
  %v10458 = vld [vmem:[%s10234 + $0x6f8] sm:$0xff]
  %v10459 = vld [vmem:[%s10234 + $0x700] sm:$0xff]
  %v10460 = vld [vmem:[%s10234 + $0x708] sm:$0xff]
  %v10461 = vld [vmem:[%s10234 + $0x710] sm:$0xff]
  %v10462 = vld [vmem:[%s10234 + $0x718] sm:$0xff]
  %v10463 = vld [vmem:[%s10234 + $0x720] sm:$0xff]
  %v10464 = vld [vmem:[%s10234 + $0x728] sm:$0xff]
  %v10465 = vld [vmem:[%s10234 + $0x730] sm:$0xff]
  %v10466 = vld [vmem:[%s10234 + $0x738] sm:$0xff]
  %v10467 = vld [vmem:[%s10234 + $0x740] sm:$0xff]
  %v10468 = vld [vmem:[%s10234 + $0x748] sm:$0xff]
  %v10469 = vld [vmem:[%s10234 + $0x750] sm:$0xff]
  %v10470 = vld [vmem:[%s10234 + $0x758] sm:$0xff]
  %v10471 = vld [vmem:[%s10234 + $0x760] sm:$0xff]
  %v10472 = vld [vmem:[%s10234 + $0x768] sm:$0xff]
  %v10473 = vld [vmem:[%s10234 + $0x770] sm:$0xff]
  %v10474 = vld [vmem:[%s10234 + $0x778] sm:$0xff]
  %v10475 = vld [vmem:[%s10234 + $0x780] sm:$0xff]
  %v10476 = vld [vmem:[%s10234 + $0x788] sm:$0xff]
  %v10477 = vld [vmem:[%s10234 + $0x790] sm:$0xff]
  %v10478 = vld [vmem:[%s10234 + $0x798] sm:$0xff]
  %v10479 = vld [vmem:[%s10234 + $0x7a0] sm:$0xff]
  %v10480 = vld [vmem:[%s10234 + $0x7a8] sm:$0xff]
  %v10481 = vld [vmem:[%s10234 + $0x7b0] sm:$0xff]
  %v10482 = vld [vmem:[%s10234 + $0x7b8] sm:$0xff]
  %v10483 = vld [vmem:[%s10234 + $0x7c0] sm:$0xff]
  %v10484 = vld [vmem:[%s10234 + $0x7c8] sm:$0xff]
  %v10485 = vld [vmem:[%s10234 + $0x7d0] sm:$0xff]
  %v10486 = vld [vmem:[%s10234 + $0x7d8] sm:$0xff]
  %v10487 = vld [vmem:[%s10234 + $0x7e0] sm:$0xff]
  %v10488 = vld [vmem:[%s10234 + $0x7e8] sm:$0xff]
  %v10489 = vld [vmem:[%s10234 + $0x7f0] sm:$0xff]
  %v10490 = vld [vmem:[%s10234 + $0x7f8] sm:$0xff]
  %v10491 = vld [vmem:[%s10234 + $0x800] sm:$0xff]
  %v10492 = vld [vmem:[%s10234 + $0x808] sm:$0xff]
  %v10493 = vld [vmem:[%s10234 + $0x810] sm:$0xff]
  %v10494 = vld [vmem:[%s10234 + $0x818] sm:$0xff]
  %v10495 = vld [vmem:[%s10234 + $0x820] sm:$0xff]
  %v10496 = vld [vmem:[%s10234 + $0x828] sm:$0xff]
  %v10497 = vld [vmem:[%s10234 + $0x830] sm:$0xff]
  %v10498 = vld [vmem:[%s10234 + $0x838] sm:$0xff]
  %v10499 = vld [vmem:[%s10234 + $0x840] sm:$0xff]
  %v10500 = vld [vmem:[%s10234 + $0x848] sm:$0xff]
  %v10501 = vld [vmem:[%s10234 + $0x850] sm:$0xff]
  %v10502 = vld [vmem:[%s10234 + $0x858] sm:$0xff]
  %v10503 = vld [vmem:[%s10234 + $0x860] sm:$0xff]
  %v10504 = vld [vmem:[%s10234 + $0x868] sm:$0xff]
  %v10505 = vld [vmem:[%s10234 + $0x870] sm:$0xff]
  %v10506 = vld [vmem:[%s10234 + $0x878] sm:$0xff]
  %v10507 = vld [vmem:[%s10234 + $0x880] sm:$0xff]
  %v10508 = vld [vmem:[%s10234 + $0x888] sm:$0xff]
  %v10509 = vld [vmem:[%s10234 + $0x890] sm:$0xff]
  %v10510 = vld [vmem:[%s10234 + $0x898] sm:$0xff]
  %v10511 = vld [vmem:[%s10234 + $0x8a0] sm:$0xff]
  %v10512 = vld [vmem:[%s10234 + $0x8a8] sm:$0xff]
  %v10513 = vld [vmem:[%s10234 + $0x8b0] sm:$0xff]
  %v10514 = vld [vmem:[%s10234 + $0x8b8] sm:$0xff]
  %v10515 = vld [vmem:[%s10234 + $0x8c0] sm:$0xff]
  %v10516 = vld [vmem:[%s10234 + $0x8c8] sm:$0xff]
  %v10517 = vld [vmem:[%s10234 + $0x8d0] sm:$0xff]
  %v10518 = vld [vmem:[%s10234 + $0x8d8] sm:$0xff]
  %v10519 = vld [vmem:[%s10234 + $0x8e0] sm:$0xff]
  %v10520 = vld [vmem:[%s10234 + $0x8e8] sm:$0xff]
  %v10521 = vld [vmem:[%s10234 + $0x8f0] sm:$0xff]
  %v10522 = vld [vmem:[%s10234 + $0x8f8] sm:$0xff]
  %v10523 = vld [vmem:[%s10234 + $0x900] sm:$0xff]
  %v10524 = vld [vmem:[%s10234 + $0x908] sm:$0xff]
  %v10525 = vld [vmem:[%s10234 + $0x910] sm:$0xff]
  %v10526 = vld [vmem:[%s10234 + $0x918] sm:$0xff]
  %v10527 = vld [vmem:[%s10234 + $0x920] sm:$0xff]
  %v10528 = vld [vmem:[%s10234 + $0x928] sm:$0xff]
  %v10529 = vld [vmem:[%s10234 + $0x930] sm:$0xff]
  %v10530 = vld [vmem:[%s10234 + $0x938] sm:$0xff]
  %v10531 = vld [vmem:[%s10234 + $0x940] sm:$0xff]
  %v10532 = vld [vmem:[%s10234 + $0x948] sm:$0xff]
  %v10533 = vld [vmem:[%s10234 + $0x950] sm:$0xff]
  %v10534 = vld [vmem:[%s10234 + $0x958] sm:$0xff]
  %v10535 = vld [vmem:[%s10234 + $0x960] sm:$0xff]
  %v10536 = vld [vmem:[%s10234 + $0x968] sm:$0xff]
  %v10537 = vld [vmem:[%s10234 + $0x970] sm:$0xff]
  %v10538 = vld [vmem:[%s10234 + $0x978] sm:$0xff]
  %v10539 = vld [vmem:[%s10234 + $0x980] sm:$0xff]
  %v10540 = vld [vmem:[%s10234 + $0x988] sm:$0xff]
  %v10541 = vld [vmem:[%s10234 + $0x990] sm:$0xff]
  %v10542 = vld [vmem:[%s10234 + $0x998] sm:$0xff]
  %v10543 = vld [vmem:[%s10234 + $0x9a0] sm:$0xff]
  %v10544 = vld [vmem:[%s10234 + $0x9a8] sm:$0xff]
  %v10545 = vld [vmem:[%s10234 + $0x9b0] sm:$0xff]
  %v10546 = vld [vmem:[%s10234 + $0x9b8] sm:$0xff]
  %v10547 = vld [vmem:[%s10234 + $0x9c0] sm:$0xf]
  %v10548 = vld [vmem:[%s10234 + $0x9c8] sm:$0xf]
  %v10549 = vld [vmem:[%s10234 + $0x9d0] sm:$0xf]
  %v10550 = vld [vmem:[%s10234 + $0x9d8] sm:$0xf]
  %v10551 = vld [vmem:[%s10234 + $0x9e0] sm:$0xf]
  %v10552 = vld [vmem:[%s10234 + $0x9e8] sm:$0xf]
  %v10553 = vld [vmem:[%s10234 + $0x9f0] sm:$0xf]
  %v10554 = vld [vmem:[%s10234 + $0x9f8] sm:$0xf]
  %v10555 = vld [vmem:[%s10234 + $0xa00] sm:$0xf]
  %v10556 = vld [vmem:[%s10234 + $0xa08] sm:$0xf]
  %v10557 = vld [vmem:[%s10234 + $0xa10] sm:$0xf]
  %v10558 = vld [vmem:[%s10234 + $0xa18] sm:$0xf]
  %v10559 = vld [vmem:[%s10234 + $0xa20] sm:$0xf]
  %v10561 = vsel %vm6358, %v10233, 0
  %v10564 = vsel %vm5651, %v10547, 0
  %v10567 = vsel %vm5651, %v10548, 0
  %v10570 = vsel %vm5651, %v10549, 0
  %v10573 = vsel %vm5651, %v10550, 0
  %v10576 = vsel %vm5651, %v10551, 0
  %v10579 = vsel %vm5651, %v10552, 0
  %v10582 = vsel %vm5651, %v10553, 0
  %v10585 = vsel %vm5651, %v10554, 0
  %v10588 = vsel %vm5651, %v10555, 0
  %v10591 = vsel %vm5651, %v10556, 0
  %v10594 = vsel %vm5651, %v10557, 0
  %v10597 = vsel %vm5651, %v10558, 0
  %v10600 = vsel %vm5651, %v10559, 0
  %10602 = vmatprep.subr.mxu0 %v10431
  %10603 = vmatpush1.msra.mxu0 %v10430
  %10604 = vmatprep.subr.mxu0 %v10418
  %10605 = vmatpush1.msra.mxu0 %v10417
  %10606 = vmatprep.subr.mxu0 %v10405
  %10607 = vmatpush1.msra.mxu0 %v10404
  %10608 = vmatprep.subr.mxu0 %v10392
  %10609 = vmatpush1.msra.mxu0 %v10391
  %10610 = vmatprep.subr.mxu0 %v10379
  %10611 = vmatpush1.msra.mxu0 %v10378
  %10612 = vmatprep.subr.mxu0 %v10366
  %10613 = vmatpush1.msra.mxu0 %v10365
  %10614 = vmatprep.subr.mxu0 %v10353
  %10615 = vmatpush1.msra.mxu0 %v10352
  %10616 = vmatprep.subr.mxu0 %v10340
  %10617 = vmatpush1.msra.mxu0 %v10339
  %10618 = vmatprep.subr.mxu0 %v10327
  %10619 = vmatpush1.msra.mxu0 %v10326
  %10620 = vmatprep.subr.mxu0 %v10314
  %10621 = vmatpush1.msra.mxu0 %v10313
  %10622 = vmatprep.subr.mxu0 %v10301
  %10623 = vmatpush1.msra.mxu0 %v10300
  %10624 = vmatprep.subr.mxu0 %v10288
  %10625 = vmatpush1.msra.mxu0 %v10287
  %10626 = vmatprep.subr.mxu0 %v10275
  %10627 = vmatpush1.msra.mxu0 %v10274
  %10628 = vmatprep.subr.mxu0 %v10262
  %10629 = vmatpush1.msra.mxu0 %v10261
  %10630 = vmatprep.subr.mxu0 %v10249
  %10631 = vmatpush1.msra.mxu0 %v10248
  %10632 = vmatprep.subr.mxu0 %v10236
  %10633 = vmatpush1.msra.mxu0 %v10235
  %10634 = vmatprep.subr.mxu0 0.0
  %10635 = vmatpush2.msra.mxu0 0.0
  %10636 = vmatprep.subr.mxu0 0.0
  %10637 = vmatpush2.msra.mxu0 0.0
  %10638 = vmatprep.subr.mxu0 0.0
  %10639 = vmatpush2.msra.mxu0 0.0
  %10640 = vmatprep.subr.mxu0 0.0
  %10641 = vmatpush2.msra.mxu0 0.0
  %10642 = vmatprep.subr.mxu0 0.0
  %10643 = vmatpush2.msra.mxu0 0.0
  %10644 = vmatprep.subr.mxu0 0.0
  %10645 = vmatpush2.msra.mxu0 0.0
  %10646 = vmatprep.subr.mxu0 0.0
  %10647 = vmatpush2.msra.mxu0 0.0
  %10648 = vmatprep.subr.mxu0 %v10567
  %10649 = vmatpush2.msra.mxu0 %v10564
  %10650 = vmatprep.subr.mxu0 %v10535
  %10651 = vmatpush2.msra.mxu0 %v10534
  %10652 = vmatprep.subr.mxu0 %v10522
  %10653 = vmatpush2.msra.mxu0 %v10521
  %10654 = vmatprep.subr.mxu0 %v10509
  %10655 = vmatpush2.msra.mxu0 %v10508
  %10656 = vmatprep.subr.mxu0 %v10496
  %10657 = vmatpush2.msra.mxu0 %v10495
  %10658 = vmatprep.subr.mxu0 %v10483
  %10659 = vmatpush2.msra.mxu0 %v10482
  %10660 = vmatprep.subr.mxu0 %v10470
  %10661 = vmatpush2.msra.mxu0 %v10469
  %10662 = vmatprep.subr.mxu0 %v10457
  %10663 = vmatpush2.msra.mxu0 %v10456
  %10664 = vmatprep.subr.mxu0 %v10444
  %10665 = vmatpush2.msra.mxu0 %v10443
  %10666 = vmatprep.mubr.f32.mxu0 %v10561
  %10667 = vmatmul.mubr.f32.gmra.mxu0 %v10232
  %v10668 = vpop.f32.mrf.mxu0
  %v10669 = vadd.f32 0.0, %v10668
  %v10670 = vpop.f32.mrf.mxu0
  %v10671 = vadd.f32 0.0, %v10670
  %10672 = vdwg.mxu0
  %10673 = vmatprep.subr.mxu0 %v10433
  %10674 = vmatpush1.msra.mxu0 %v10432
  %10675 = vmatprep.subr.mxu0 %v10420
  %10676 = vmatpush1.msra.mxu0 %v10419
  %10677 = vmatprep.subr.mxu0 %v10407
  %10678 = vmatpush1.msra.mxu0 %v10406
  %10679 = vmatprep.subr.mxu0 %v10394
  %10680 = vmatpush1.msra.mxu0 %v10393
  %10681 = vmatprep.subr.mxu0 %v10381
  %10682 = vmatpush1.msra.mxu0 %v10380
  %10683 = vmatprep.subr.mxu0 %v10368
  %10684 = vmatpush1.msra.mxu0 %v10367
  %10685 = vmatprep.subr.mxu0 %v10355
  %10686 = vmatpush1.msra.mxu0 %v10354
  %10687 = vmatprep.subr.mxu0 %v10342
  %10688 = vmatpush1.msra.mxu0 %v10341
  %10689 = vmatprep.subr.mxu0 %v10329
  %10690 = vmatpush1.msra.mxu0 %v10328
  %10691 = vmatprep.subr.mxu0 %v10316
  %10692 = vmatpush1.msra.mxu0 %v10315
  %10693 = vmatprep.subr.mxu0 %v10303
  %10694 = vmatpush1.msra.mxu0 %v10302
  %10695 = vmatprep.subr.mxu0 %v10290
  %10696 = vmatpush1.msra.mxu0 %v10289
  %10697 = vmatprep.subr.mxu0 %v10277
  %10698 = vmatpush1.msra.mxu0 %v10276
  %10699 = vmatprep.subr.mxu0 %v10264
  %10700 = vmatpush1.msra.mxu0 %v10263
  %10701 = vmatprep.subr.mxu0 %v10251
  %10702 = vmatpush1.msra.mxu0 %v10250
  %10703 = vmatprep.subr.mxu0 %v10238
  %10704 = vmatpush1.msra.mxu0 %v10237
  %10705 = vmatprep.subr.mxu0 0.0
  %10706 = vmatpush2.msra.mxu0 0.0
  %10707 = vmatprep.subr.mxu0 0.0
  %10708 = vmatpush2.msra.mxu0 0.0
  %10709 = vmatprep.subr.mxu0 0.0
  %10710 = vmatpush2.msra.mxu0 0.0
  %10711 = vmatprep.subr.mxu0 0.0
  %10712 = vmatpush2.msra.mxu0 0.0
  %10713 = vmatprep.subr.mxu0 0.0
  %10714 = vmatpush2.msra.mxu0 0.0
  %10715 = vmatprep.subr.mxu0 0.0
  %10716 = vmatpush2.msra.mxu0 0.0
  %10717 = vmatprep.subr.mxu0 0.0
  %10718 = vmatpush2.msra.mxu0 0.0
  %10719 = vmatprep.subr.mxu0 %v10573
  %10720 = vmatpush2.msra.mxu0 %v10570
  %10721 = vmatprep.subr.mxu0 %v10537
  %10722 = vmatpush2.msra.mxu0 %v10536
  %10723 = vmatprep.subr.mxu0 %v10524
  %10724 = vmatpush2.msra.mxu0 %v10523
  %10725 = vmatprep.subr.mxu0 %v10511
  %10726 = vmatpush2.msra.mxu0 %v10510
  %10727 = vmatprep.subr.mxu0 %v10498
  %10728 = vmatpush2.msra.mxu0 %v10497
  %10729 = vmatprep.subr.mxu0 %v10485
  %10730 = vmatpush2.msra.mxu0 %v10484
  %10731 = vmatprep.subr.mxu0 %v10472
  %10732 = vmatpush2.msra.mxu0 %v10471
  %10733 = vmatprep.subr.mxu0 %v10459
  %10734 = vmatpush2.msra.mxu0 %v10458
  %10735 = vmatprep.subr.mxu0 %v10446
  %10736 = vmatpush2.msra.mxu0 %v10445
  %10737 = vmatprep.mubr.f32.mxu0 %v10561
  %10738 = vmatmul.mubr.f32.gmra.mxu0 %v10232
  %v10739 = vpop.f32.mrf.mxu0
  %v10740 = vadd.f32 0.0, %v10739
  %v10741 = vpop.f32.mrf.mxu0
  %v10742 = vadd.f32 0.0, %v10741
  %10743 = vdwg.mxu0
  %10744 = vmatprep.subr.mxu0 %v10435
  %10745 = vmatpush1.msra.mxu0 %v10434
  %10746 = vmatprep.subr.mxu0 %v10422
  %10747 = vmatpush1.msra.mxu0 %v10421
  %10748 = vmatprep.subr.mxu0 %v10409
  %10749 = vmatpush1.msra.mxu0 %v10408
  %10750 = vmatprep.subr.mxu0 %v10396
  %10751 = vmatpush1.msra.mxu0 %v10395
  %10752 = vmatprep.subr.mxu0 %v10383
  %10753 = vmatpush1.msra.mxu0 %v10382
  %10754 = vmatprep.subr.mxu0 %v10370
  %10755 = vmatpush1.msra.mxu0 %v10369
  %10756 = vmatprep.subr.mxu0 %v10357
  %10757 = vmatpush1.msra.mxu0 %v10356
  %10758 = vmatprep.subr.mxu0 %v10344
  %10759 = vmatpush1.msra.mxu0 %v10343
  %10760 = vmatprep.subr.mxu0 %v10331
  %10761 = vmatpush1.msra.mxu0 %v10330
  %10762 = vmatprep.subr.mxu0 %v10318
  %10763 = vmatpush1.msra.mxu0 %v10317
  %10764 = vmatprep.subr.mxu0 %v10305
  %10765 = vmatpush1.msra.mxu0 %v10304
  %10766 = vmatprep.subr.mxu0 %v10292
  %10767 = vmatpush1.msra.mxu0 %v10291
  %10768 = vmatprep.subr.mxu0 %v10279
  %10769 = vmatpush1.msra.mxu0 %v10278
  %10770 = vmatprep.subr.mxu0 %v10266
  %10771 = vmatpush1.msra.mxu0 %v10265
  %10772 = vmatprep.subr.mxu0 %v10253
  %10773 = vmatpush1.msra.mxu0 %v10252
  %10774 = vmatprep.subr.mxu0 %v10240
  %10775 = vmatpush1.msra.mxu0 %v10239
  %10776 = vmatprep.subr.mxu0 0.0
  %10777 = vmatpush2.msra.mxu0 0.0
  %10778 = vmatprep.subr.mxu0 0.0
  %10779 = vmatpush2.msra.mxu0 0.0
  %10780 = vmatprep.subr.mxu0 0.0
  %10781 = vmatpush2.msra.mxu0 0.0
  %10782 = vmatprep.subr.mxu0 0.0
  %10783 = vmatpush2.msra.mxu0 0.0
  %10784 = vmatprep.subr.mxu0 0.0
  %10785 = vmatpush2.msra.mxu0 0.0
  %10786 = vmatprep.subr.mxu0 0.0
  %10787 = vmatpush2.msra.mxu0 0.0
  %10788 = vmatprep.subr.mxu0 0.0
  %10789 = vmatpush2.msra.mxu0 0.0
  %10790 = vmatprep.subr.mxu0 %v10579
  %10791 = vmatpush2.msra.mxu0 %v10576
  %10792 = vmatprep.subr.mxu0 %v10539
  %10793 = vmatpush2.msra.mxu0 %v10538
  %10794 = vmatprep.subr.mxu0 %v10526
  %10795 = vmatpush2.msra.mxu0 %v10525
  %10796 = vmatprep.subr.mxu0 %v10513
  %10797 = vmatpush2.msra.mxu0 %v10512
  %10798 = vmatprep.subr.mxu0 %v10500
  %10799 = vmatpush2.msra.mxu0 %v10499
  %10800 = vmatprep.subr.mxu0 %v10487
  %10801 = vmatpush2.msra.mxu0 %v10486
  %10802 = vmatprep.subr.mxu0 %v10474
  %10803 = vmatpush2.msra.mxu0 %v10473
  %10804 = vmatprep.subr.mxu0 %v10461
  %10805 = vmatpush2.msra.mxu0 %v10460
  %10806 = vmatprep.subr.mxu0 %v10448
  %10807 = vmatpush2.msra.mxu0 %v10447
  %10808 = vmatprep.mubr.f32.mxu0 %v10561
  %10809 = vmatmul.mubr.f32.gmra.mxu0 %v10232
  %v10810 = vpop.f32.mrf.mxu0
  %v10811 = vadd.f32 0.0, %v10810
  %v10812 = vpop.f32.mrf.mxu0
  %v10813 = vadd.f32 0.0, %v10812
  %10814 = vdwg.mxu0
  %10815 = vmatprep.subr.mxu0 %v10437
  %10816 = vmatpush1.msra.mxu0 %v10436
  %10817 = vmatprep.subr.mxu0 %v10424
  %10818 = vmatpush1.msra.mxu0 %v10423
  %10819 = vmatprep.subr.mxu0 %v10411
  %10820 = vmatpush1.msra.mxu0 %v10410
  %10821 = vmatprep.subr.mxu0 %v10398
  %10822 = vmatpush1.msra.mxu0 %v10397
  %10823 = vmatprep.subr.mxu0 %v10385
  %10824 = vmatpush1.msra.mxu0 %v10384
  %10825 = vmatprep.subr.mxu0 %v10372
  %10826 = vmatpush1.msra.mxu0 %v10371
  %10827 = vmatprep.subr.mxu0 %v10359
  %10828 = vmatpush1.msra.mxu0 %v10358
  %10829 = vmatprep.subr.mxu0 %v10346
  %10830 = vmatpush1.msra.mxu0 %v10345
  %10831 = vmatprep.subr.mxu0 %v10333
  %10832 = vmatpush1.msra.mxu0 %v10332
  %10833 = vmatprep.subr.mxu0 %v10320
  %10834 = vmatpush1.msra.mxu0 %v10319
  %10835 = vmatprep.subr.mxu0 %v10307
  %10836 = vmatpush1.msra.mxu0 %v10306
  %10837 = vmatprep.subr.mxu0 %v10294
  %10838 = vmatpush1.msra.mxu0 %v10293
  %10839 = vmatprep.subr.mxu0 %v10281
  %10840 = vmatpush1.msra.mxu0 %v10280
  %10841 = vmatprep.subr.mxu0 %v10268
  %10842 = vmatpush1.msra.mxu0 %v10267
  %10843 = vmatprep.subr.mxu0 %v10255
  %10844 = vmatpush1.msra.mxu0 %v10254
  %10845 = vmatprep.subr.mxu0 %v10242
  %10846 = vmatpush1.msra.mxu0 %v10241
  %10847 = vmatprep.subr.mxu0 0.0
  %10848 = vmatpush2.msra.mxu0 0.0
  %10849 = vmatprep.subr.mxu0 0.0
  %10850 = vmatpush2.msra.mxu0 0.0
  %10851 = vmatprep.subr.mxu0 0.0
  %10852 = vmatpush2.msra.mxu0 0.0
  %10853 = vmatprep.subr.mxu0 0.0
  %10854 = vmatpush2.msra.mxu0 0.0
  %10855 = vmatprep.subr.mxu0 0.0
  %10856 = vmatpush2.msra.mxu0 0.0
  %10857 = vmatprep.subr.mxu0 0.0
  %10858 = vmatpush2.msra.mxu0 0.0
  %10859 = vmatprep.subr.mxu0 0.0
  %10860 = vmatpush2.msra.mxu0 0.0
  %10861 = vmatprep.subr.mxu0 %v10585
  %10862 = vmatpush2.msra.mxu0 %v10582
  %10863 = vmatprep.subr.mxu0 %v10541
  %10864 = vmatpush2.msra.mxu0 %v10540
  %10865 = vmatprep.subr.mxu0 %v10528
  %10866 = vmatpush2.msra.mxu0 %v10527
  %10867 = vmatprep.subr.mxu0 %v10515
  %10868 = vmatpush2.msra.mxu0 %v10514
  %10869 = vmatprep.subr.mxu0 %v10502
  %10870 = vmatpush2.msra.mxu0 %v10501
  %10871 = vmatprep.subr.mxu0 %v10489
  %10872 = vmatpush2.msra.mxu0 %v10488
  %10873 = vmatprep.subr.mxu0 %v10476
  %10874 = vmatpush2.msra.mxu0 %v10475
  %10875 = vmatprep.subr.mxu0 %v10463
  %10876 = vmatpush2.msra.mxu0 %v10462
  %10877 = vmatprep.subr.mxu0 %v10450
  %10878 = vmatpush2.msra.mxu0 %v10449
  %10879 = vmatprep.mubr.f32.mxu0 %v10561
  %10880 = vmatmul.mubr.f32.gmra.mxu0 %v10232
  %v10881 = vpop.f32.mrf.mxu0
  %v10882 = vadd.f32 0.0, %v10881
  %v10883 = vpop.f32.mrf.mxu0
  %v10884 = vadd.f32 0.0, %v10883
  %10885 = vdwg.mxu0
  %10886 = vmatprep.subr.mxu0 %v10439
  %10887 = vmatpush1.msra.mxu0 %v10438
  %10888 = vmatprep.subr.mxu0 %v10426
  %10889 = vmatpush1.msra.mxu0 %v10425
  %10890 = vmatprep.subr.mxu0 %v10413
  %10891 = vmatpush1.msra.mxu0 %v10412
  %10892 = vmatprep.subr.mxu0 %v10400
  %10893 = vmatpush1.msra.mxu0 %v10399
  %10894 = vmatprep.subr.mxu0 %v10387
  %10895 = vmatpush1.msra.mxu0 %v10386
  %10896 = vmatprep.subr.mxu0 %v10374
  %10897 = vmatpush1.msra.mxu0 %v10373
  %10898 = vmatprep.subr.mxu0 %v10361
  %10899 = vmatpush1.msra.mxu0 %v10360
  %10900 = vmatprep.subr.mxu0 %v10348
  %10901 = vmatpush1.msra.mxu0 %v10347
  %10902 = vmatprep.subr.mxu0 %v10335
  %10903 = vmatpush1.msra.mxu0 %v10334
  %10904 = vmatprep.subr.mxu0 %v10322
  %10905 = vmatpush1.msra.mxu0 %v10321
  %10906 = vmatprep.subr.mxu0 %v10309
  %10907 = vmatpush1.msra.mxu0 %v10308
  %10908 = vmatprep.subr.mxu0 %v10296
  %10909 = vmatpush1.msra.mxu0 %v10295
  %10910 = vmatprep.subr.mxu0 %v10283
  %10911 = vmatpush1.msra.mxu0 %v10282
  %10912 = vmatprep.subr.mxu0 %v10270
  %10913 = vmatpush1.msra.mxu0 %v10269
  %10914 = vmatprep.subr.mxu0 %v10257
  %10915 = vmatpush1.msra.mxu0 %v10256
  %10916 = vmatprep.subr.mxu0 %v10244
  %10917 = vmatpush1.msra.mxu0 %v10243
  %10918 = vmatprep.subr.mxu0 0.0
  %10919 = vmatpush2.msra.mxu0 0.0
  %10920 = vmatprep.subr.mxu0 0.0
  %10921 = vmatpush2.msra.mxu0 0.0
  %10922 = vmatprep.subr.mxu0 0.0
  %10923 = vmatpush2.msra.mxu0 0.0
  %10924 = vmatprep.subr.mxu0 0.0
  %10925 = vmatpush2.msra.mxu0 0.0
  %10926 = vmatprep.subr.mxu0 0.0
  %10927 = vmatpush2.msra.mxu0 0.0
  %10928 = vmatprep.subr.mxu0 0.0
  %10929 = vmatpush2.msra.mxu0 0.0
  %10930 = vmatprep.subr.mxu0 0.0
  %10931 = vmatpush2.msra.mxu0 0.0
  %10932 = vmatprep.subr.mxu0 %v10591
  %10933 = vmatpush2.msra.mxu0 %v10588
  %10934 = vmatprep.subr.mxu0 %v10543
  %10935 = vmatpush2.msra.mxu0 %v10542
  %10936 = vmatprep.subr.mxu0 %v10530
  %10937 = vmatpush2.msra.mxu0 %v10529
  %10938 = vmatprep.subr.mxu0 %v10517
  %10939 = vmatpush2.msra.mxu0 %v10516
  %10940 = vmatprep.subr.mxu0 %v10504
  %10941 = vmatpush2.msra.mxu0 %v10503
  %10942 = vmatprep.subr.mxu0 %v10491
  %10943 = vmatpush2.msra.mxu0 %v10490
  %10944 = vmatprep.subr.mxu0 %v10478
  %10945 = vmatpush2.msra.mxu0 %v10477
  %10946 = vmatprep.subr.mxu0 %v10465
  %10947 = vmatpush2.msra.mxu0 %v10464
  %10948 = vmatprep.subr.mxu0 %v10452
  %10949 = vmatpush2.msra.mxu0 %v10451
  %10950 = vmatprep.mubr.f32.mxu0 %v10561
  %10951 = vmatmul.mubr.f32.gmra.mxu0 %v10232
  %v10952 = vpop.f32.mrf.mxu0
  %v10953 = vadd.f32 0.0, %v10952
  %v10954 = vpop.f32.mrf.mxu0
  %v10955 = vadd.f32 0.0, %v10954
  %10956 = vdwg.mxu0
  %10957 = vmatprep.subr.mxu0 %v10441
  %10958 = vmatpush1.msra.mxu0 %v10440
  %10959 = vmatprep.subr.mxu0 %v10428
  %10960 = vmatpush1.msra.mxu0 %v10427
  %10961 = vmatprep.subr.mxu0 %v10415
  %10962 = vmatpush1.msra.mxu0 %v10414
  %10963 = vmatprep.subr.mxu0 %v10402
  %10964 = vmatpush1.msra.mxu0 %v10401
  %10965 = vmatprep.subr.mxu0 %v10389
  %10966 = vmatpush1.msra.mxu0 %v10388
  %10967 = vmatprep.subr.mxu0 %v10376
  %10968 = vmatpush1.msra.mxu0 %v10375
  %10969 = vmatprep.subr.mxu0 %v10363
  %10970 = vmatpush1.msra.mxu0 %v10362
  %10971 = vmatprep.subr.mxu0 %v10350
  %10972 = vmatpush1.msra.mxu0 %v10349
  %10973 = vmatprep.subr.mxu0 %v10337
  %10974 = vmatpush1.msra.mxu0 %v10336
  %10975 = vmatprep.subr.mxu0 %v10324
  %10976 = vmatpush1.msra.mxu0 %v10323
  %10977 = vmatprep.subr.mxu0 %v10311
  %10978 = vmatpush1.msra.mxu0 %v10310
  %10979 = vmatprep.subr.mxu0 %v10298
  %10980 = vmatpush1.msra.mxu0 %v10297
  %10981 = vmatprep.subr.mxu0 %v10285
  %10982 = vmatpush1.msra.mxu0 %v10284
  %10983 = vmatprep.subr.mxu0 %v10272
  %10984 = vmatpush1.msra.mxu0 %v10271
  %10985 = vmatprep.subr.mxu0 %v10259
  %10986 = vmatpush1.msra.mxu0 %v10258
  %10987 = vmatprep.subr.mxu0 %v10246
  %10988 = vmatpush1.msra.mxu0 %v10245
  %10989 = vmatprep.subr.mxu0 0.0
  %10990 = vmatpush2.msra.mxu0 0.0
  %10991 = vmatprep.subr.mxu0 0.0
  %10992 = vmatpush2.msra.mxu0 0.0
  %10993 = vmatprep.subr.mxu0 0.0
  %10994 = vmatpush2.msra.mxu0 0.0
  %10995 = vmatprep.subr.mxu0 0.0
  %10996 = vmatpush2.msra.mxu0 0.0
  %10997 = vmatprep.subr.mxu0 0.0
  %10998 = vmatpush2.msra.mxu0 0.0
  %10999 = vmatprep.subr.mxu0 0.0
  %11000 = vmatpush2.msra.mxu0 0.0
  %11001 = vmatprep.subr.mxu0 0.0
  %11002 = vmatpush2.msra.mxu0 0.0
  %11003 = vmatprep.subr.mxu0 %v10597
  %11004 = vmatpush2.msra.mxu0 %v10594
  %11005 = vmatprep.subr.mxu0 %v10545
  %11006 = vmatpush2.msra.mxu0 %v10544
  %11007 = vmatprep.subr.mxu0 %v10532
  %11008 = vmatpush2.msra.mxu0 %v10531
  %11009 = vmatprep.subr.mxu0 %v10519
  %11010 = vmatpush2.msra.mxu0 %v10518
  %11011 = vmatprep.subr.mxu0 %v10506
  %11012 = vmatpush2.msra.mxu0 %v10505
  %11013 = vmatprep.subr.mxu0 %v10493
  %11014 = vmatpush2.msra.mxu0 %v10492
  %11015 = vmatprep.subr.mxu0 %v10480
  %11016 = vmatpush2.msra.mxu0 %v10479
  %11017 = vmatprep.subr.mxu0 %v10467
  %11018 = vmatpush2.msra.mxu0 %v10466
  %11019 = vmatprep.subr.mxu0 %v10454
  %11020 = vmatpush2.msra.mxu0 %v10453
  %11021 = vmatprep.mubr.f32.mxu0 %v10561
  %11022 = vmatmul.mubr.f32.gmra.mxu0 %v10232
  %v11023 = vpop.f32.mrf.mxu0
  %v11024 = vadd.f32 0.0, %v11023
  %v11025 = vpop.f32.mrf.mxu0
  %v11026 = vadd.f32 0.0, %v11025
  %11027 = vdwg.mxu0
  %11028 = vmatprep.subr.mxu0 0.0
  %11029 = vmatpush1.msra.mxu0 %v10442
  %11030 = vmatprep.subr.mxu0 0.0
  %11031 = vmatpush1.msra.mxu0 %v10429
  %11032 = vmatprep.subr.mxu0 0.0
  %11033 = vmatpush1.msra.mxu0 %v10416
  %11034 = vmatprep.subr.mxu0 0.0
  %11035 = vmatpush1.msra.mxu0 %v10403
  %11036 = vmatprep.subr.mxu0 0.0
  %11037 = vmatpush1.msra.mxu0 %v10390
  %11038 = vmatprep.subr.mxu0 0.0
  %11039 = vmatpush1.msra.mxu0 %v10377
  %11040 = vmatprep.subr.mxu0 0.0
  %11041 = vmatpush1.msra.mxu0 %v10364
  %11042 = vmatprep.subr.mxu0 0.0
  %11043 = vmatpush1.msra.mxu0 %v10351
  %11044 = vmatprep.subr.mxu0 0.0
  %11045 = vmatpush1.msra.mxu0 %v10338
  %11046 = vmatprep.subr.mxu0 0.0
  %11047 = vmatpush1.msra.mxu0 %v10325
  %11048 = vmatprep.subr.mxu0 0.0
  %11049 = vmatpush1.msra.mxu0 %v10312
  %11050 = vmatprep.subr.mxu0 0.0
  %11051 = vmatpush1.msra.mxu0 %v10299
  %11052 = vmatprep.subr.mxu0 0.0
  %11053 = vmatpush1.msra.mxu0 %v10286
  %11054 = vmatprep.subr.mxu0 0.0
  %11055 = vmatpush1.msra.mxu0 %v10273
  %11056 = vmatprep.subr.mxu0 0.0
  %11057 = vmatpush1.msra.mxu0 %v10260
  %11058 = vmatprep.subr.mxu0 0.0
  %11059 = vmatpush1.msra.mxu0 %v10247
  %11060 = vmatprep.subr.mxu0 0.0
  %11061 = vmatpush2.msra.mxu0 0.0
  %11062 = vmatprep.subr.mxu0 0.0
  %11063 = vmatpush2.msra.mxu0 0.0
  %11064 = vmatprep.subr.mxu0 0.0
  %11065 = vmatpush2.msra.mxu0 0.0
  %11066 = vmatprep.subr.mxu0 0.0
  %11067 = vmatpush2.msra.mxu0 0.0
  %11068 = vmatprep.subr.mxu0 0.0
  %11069 = vmatpush2.msra.mxu0 0.0
  %11070 = vmatprep.subr.mxu0 0.0
  %11071 = vmatpush2.msra.mxu0 0.0
  %11072 = vmatprep.subr.mxu0 0.0
  %11073 = vmatpush2.msra.mxu0 0.0
  %11074 = vmatprep.subr.mxu0 0.0
  %11075 = vmatpush2.msra.mxu0 %v10600
  %11076 = vmatprep.subr.mxu0 0.0
  %11077 = vmatpush2.msra.mxu0 %v10546
  %11078 = vmatprep.subr.mxu0 0.0
  %11079 = vmatpush2.msra.mxu0 %v10533
  %11080 = vmatprep.subr.mxu0 0.0
  %11081 = vmatpush2.msra.mxu0 %v10520
  %11082 = vmatprep.subr.mxu0 0.0
  %11083 = vmatpush2.msra.mxu0 %v10507
  %11084 = vmatprep.subr.mxu0 0.0
  %11085 = vmatpush2.msra.mxu0 %v10494
  %11086 = vmatprep.subr.mxu0 0.0
  %11087 = vmatpush2.msra.mxu0 %v10481
  %11088 = vmatprep.subr.mxu0 0.0
  %11089 = vmatpush2.msra.mxu0 %v10468
  %11090 = vmatprep.subr.mxu0 0.0
  %11091 = vmatpush2.msra.mxu0 %v10455
  %11092 = vmatprep.mubr.f32.mxu0 %v10561
  %11093 = vmatmul.mubr.f32.gmra.mxu0 %v10232
  %v11094 = vpop.f32.mrf.mxu0
  %v11095 = vadd.f32 0.0, %v11094
  %v11096 = vpop.f32.mrf.mxu0
  %11097 = vdwg.mxu0
  %v11098 = vadd.f32 %v10179, %v10669
  %v11099 = vadd.f32 %v10180, %v10671
  %v11100 = vadd.f32 %v10181, %v10740
  %v11101 = vadd.f32 %v10182, %v10742
  %v11102 = vadd.f32 %v10183, %v10811
  %v11103 = vadd.f32 %v10184, %v10813
  %v11104 = vadd.f32 %v10185, %v10882
  %v11105 = vadd.f32 %v10186, %v10884
  %v11106 = vadd.f32 %v10187, %v10953
  %v11107 = vadd.f32 %v10188, %v10955
  %v11108 = vadd.f32 %v10189, %v11024
  %v11109 = vadd.f32 %v10190, %v11026
  %v11110 = vadd.f32 %v10191, %v11095
  %v11111 = vld [vmem:[%s5] sm:$0xff]
  %v11112 = vld [vmem:[%s5 + $0x8] sm:$0x1f]
  %v11115 = vlaneseq
  %v11116 = vshrl.u32 %v11115, 7
  %v11117 = vsub.s32 0, %v11116
  %v11118 = vrot.slane %v11111, %v11117
  %v11119 = vlaneseq
  %v11120 = vshrl.u32 %v11119, 7
  %v11121 = vsub.s32 1, %v11120
  %v11122 = vrot.slane %v11111, %v11121
  %v11123 = vlaneseq
  %v11124 = vshrl.u32 %v11123, 7
  %v11125 = vsub.s32 2, %v11124
  %v11126 = vrot.slane %v11111, %v11125
  %v11127 = vlaneseq
  %v11128 = vshrl.u32 %v11127, 7
  %v11129 = vsub.s32 3, %v11128
  %v11130 = vrot.slane %v11111, %v11129
  %v11131 = vlaneseq
  %v11132 = vshrl.u32 %v11131, 7
  %v11133 = vsub.s32 4, %v11132
  %v11134 = vrot.slane %v11111, %v11133
  %v11135 = vlaneseq
  %v11136 = vshrl.u32 %v11135, 7
  %v11137 = vsub.s32 5, %v11136
  %v11138 = vrot.slane %v11111, %v11137
  %v11139 = vlaneseq
  %v11140 = vshrl.u32 %v11139, 7
  %v11141 = vsub.s32 6, %v11140
  %v11142 = vrot.slane %v11111, %v11141
  %v11143 = vlaneseq
  %v11144 = vshrl.u32 %v11143, 7
  %v11145 = vsub.s32 7, %v11144
  %v11146 = vrot.slane %v11111, %v11145
  %v11147 = vlaneseq
  %v11148 = vshrl.u32 %v11147, 7
  %v11149 = vsub.s32 0, %v11148
  %v11150 = vrot.slane %v11112, %v11149
  %v11151 = vlaneseq
  %v11152 = vshrl.u32 %v11151, 7
  %v11153 = vsub.s32 1, %v11152
  %v11154 = vrot.slane %v11112, %v11153
  %v11155 = vlaneseq
  %v11156 = vshrl.u32 %v11155, 7
  %v11157 = vsub.s32 2, %v11156
  %v11158 = vrot.slane %v11112, %v11157
  %v11159 = vlaneseq
  %v11160 = vshrl.u32 %v11159, 7
  %v11161 = vsub.s32 3, %v11160
  %v11162 = vrot.slane %v11112, %v11161
  %v11163 = vlaneseq
  %v11164 = vshrl.u32 %v11163, 7
  %v11165 = vsub.s32 4, %v11164
  %v11166 = vrot.slane %v11112, %v11165
  %v11180 = vadd.f32 %v11098, %v11118
  %v11181 = vadd.f32 %v11099, %v11122
  %v11182 = vadd.f32 %v11100, %v11126
  %v11183 = vadd.f32 %v11101, %v11130
  %v11184 = vadd.f32 %v11102, %v11134
  %v11185 = vadd.f32 %v11103, %v11138
  %v11186 = vadd.f32 %v11104, %v11142
  %v11187 = vadd.f32 %v11105, %v11146
  %v11188 = vadd.f32 %v11106, %v11150
  %v11189 = vadd.f32 %v11107, %v11154
  %v11190 = vadd.f32 %v11108, %v11158
  %v11191 = vadd.f32 %v11109, %v11162
  %v11192 = vadd.f32 %v11110, %v11166
  %v11193 = vtanh.pop %v11180
  %v11194 = vtanh.pop %v11181
  %v11195 = vtanh.pop %v11182
  %v11196 = vtanh.pop %v11183
  %v11197 = vtanh.pop %v11184
  %v11198 = vtanh.pop %v11185
  %v11199 = vtanh.pop %v11186
  %v11200 = vtanh.pop %v11187
  %v11201 = vtanh.pop %v11188
  %v11202 = vtanh.pop %v11189
  %v11203 = vtanh.pop %v11190
  %v11204 = vtanh.pop %v11191
  %v11205 = vtanh.pop %v11192
  %v11206 = vld [vmem:[%s6] sm:$0xff]
  %v11207 = vld [vmem:[%s6 + $0x8] sm:$0xff]
  %v11208 = vld [vmem:[%s6 + $0x10] sm:$0xff]
  %v11209 = vld [vmem:[%s6 + $0x18] sm:$0xff]
  %v11210 = vld [vmem:[%s6 + $0x20] sm:$0xff]
  %v11211 = vld [vmem:[%s6 + $0x28] sm:$0xff]
  %v11212 = vld [vmem:[%s6 + $0x30] sm:$0xff]
  %v11213 = vld [vmem:[%s6 + $0x38] sm:$0xff]
  %v11214 = vld [vmem:[%s6 + $0x40] sm:$0xff]
  %v11215 = vld [vmem:[%s6 + $0x48] sm:$0xff]
  %v11216 = vld [vmem:[%s6 + $0x50] sm:$0xff]
  %v11217 = vld [vmem:[%s6 + $0x58] sm:$0xff]
  %v11218 = vld [vmem:[%s6 + $0x60] sm:$0xff]
  %v11219 = vld [vmem:[%s6 + $0x68] sm:$0xff]
  %v11220 = vld [vmem:[%s6 + $0x70] sm:$0xff]
  %v11221 = vld [vmem:[%s6 + $0x78] sm:$0xff]
  %v11222 = vld [vmem:[%s6 + $0x80] sm:$0xff]
  %v11223 = vld [vmem:[%s6 + $0x88] sm:$0xff]
  %v11224 = vld [vmem:[%s6 + $0x90] sm:$0xff]
  %v11225 = vld [vmem:[%s6 + $0x98] sm:$0xff]
  %v11226 = vld [vmem:[%s6 + $0xa0] sm:$0xff]
  %v11227 = vld [vmem:[%s6 + $0xa8] sm:$0xff]
  %v11228 = vld [vmem:[%s6 + $0xb0] sm:$0xff]
  %v11229 = vld [vmem:[%s6 + $0xb8] sm:$0xff]
  %v11230 = vld [vmem:[%s6 + $0xc0] sm:$0xff]
  %v11231 = vld [vmem:[%s6 + $0xc8] sm:$0xff]
  %v11232 = vld [vmem:[%s6 + $0xd0] sm:$0xff]
  %v11233 = vld [vmem:[%s6 + $0xd8] sm:$0xff]
  %v11234 = vld [vmem:[%s6 + $0xe0] sm:$0xff]
  %v11235 = vld [vmem:[%s6 + $0xe8] sm:$0xff]
  %v11236 = vld [vmem:[%s6 + $0xf0] sm:$0xff]
  %v11237 = vld [vmem:[%s6 + $0xf8] sm:$0xff]
  %v11238 = vld [vmem:[%s6 + $0x100] sm:$0xff]
  %v11239 = vld [vmem:[%s6 + $0x108] sm:$0xff]
  %v11240 = vld [vmem:[%s6 + $0x110] sm:$0xff]
  %v11241 = vld [vmem:[%s6 + $0x118] sm:$0xff]
  %v11242 = vld [vmem:[%s6 + $0x120] sm:$0xff]
  %v11243 = vld [vmem:[%s6 + $0x128] sm:$0xff]
  %v11244 = vld [vmem:[%s6 + $0x130] sm:$0xff]
  %v11245 = vld [vmem:[%s6 + $0x138] sm:$0xff]
  %v11246 = vld [vmem:[%s6 + $0x140] sm:$0xff]
  %v11247 = vld [vmem:[%s6 + $0x148] sm:$0xff]
  %v11248 = vld [vmem:[%s6 + $0x150] sm:$0xff]
  %v11249 = vld [vmem:[%s6 + $0x158] sm:$0xff]
  %v11250 = vld [vmem:[%s6 + $0x160] sm:$0xff]
  %v11251 = vld [vmem:[%s6 + $0x168] sm:$0xff]
  %v11252 = vld [vmem:[%s6 + $0x170] sm:$0xff]
  %v11253 = vld [vmem:[%s6 + $0x178] sm:$0xff]
  %v11254 = vld [vmem:[%s6 + $0x180] sm:$0xff]
  %v11255 = vld [vmem:[%s6 + $0x188] sm:$0xff]
  %v11256 = vld [vmem:[%s6 + $0x190] sm:$0xff]
  %v11257 = vld [vmem:[%s6 + $0x198] sm:$0xff]
  %v11258 = vld [vmem:[%s6 + $0x1a0] sm:$0xff]
  %v11259 = vld [vmem:[%s6 + $0x1a8] sm:$0xff]
  %v11260 = vld [vmem:[%s6 + $0x1b0] sm:$0xff]
  %v11261 = vld [vmem:[%s6 + $0x1b8] sm:$0xff]
  %v11262 = vld [vmem:[%s6 + $0x1c0] sm:$0xff]
  %v11263 = vld [vmem:[%s6 + $0x1c8] sm:$0xff]
  %v11264 = vld [vmem:[%s6 + $0x1d0] sm:$0xff]
  %v11265 = vld [vmem:[%s6 + $0x1d8] sm:$0xff]
  %v11266 = vld [vmem:[%s6 + $0x1e0] sm:$0xff]
  %v11267 = vld [vmem:[%s6 + $0x1e8] sm:$0xff]
  %v11268 = vld [vmem:[%s6 + $0x1f0] sm:$0xff]
  %v11269 = vld [vmem:[%s6 + $0x1f8] sm:$0xff]
  %v11270 = vld [vmem:[%s6 + $0x200] sm:$0xff]
  %v11271 = vld [vmem:[%s6 + $0x208] sm:$0xff]
  %v11272 = vld [vmem:[%s6 + $0x210] sm:$0xff]
  %v11273 = vld [vmem:[%s6 + $0x218] sm:$0xff]
  %v11274 = vld [vmem:[%s6 + $0x220] sm:$0xff]
  %v11275 = vld [vmem:[%s6 + $0x228] sm:$0xff]
  %v11276 = vld [vmem:[%s6 + $0x230] sm:$0xff]
  %v11277 = vld [vmem:[%s6 + $0x238] sm:$0xff]
  %v11278 = vld [vmem:[%s6 + $0x240] sm:$0xff]
  %v11279 = vld [vmem:[%s6 + $0x248] sm:$0xff]
  %v11280 = vld [vmem:[%s6 + $0x250] sm:$0xff]
  %v11281 = vld [vmem:[%s6 + $0x258] sm:$0xff]
  %v11282 = vld [vmem:[%s6 + $0x260] sm:$0xff]
  %v11283 = vld [vmem:[%s6 + $0x268] sm:$0xff]
  %v11284 = vld [vmem:[%s6 + $0x270] sm:$0xff]
  %v11285 = vld [vmem:[%s6 + $0x278] sm:$0xff]
  %v11286 = vld [vmem:[%s6 + $0x280] sm:$0xff]
  %v11287 = vld [vmem:[%s6 + $0x288] sm:$0xff]
  %v11288 = vld [vmem:[%s6 + $0x290] sm:$0xff]
  %v11289 = vld [vmem:[%s6 + $0x298] sm:$0xff]
  %v11290 = vld [vmem:[%s6 + $0x2a0] sm:$0xff]
  %v11291 = vld [vmem:[%s6 + $0x2a8] sm:$0xff]
  %v11292 = vld [vmem:[%s6 + $0x2b0] sm:$0xff]
  %v11293 = vld [vmem:[%s6 + $0x2b8] sm:$0xff]
  %v11294 = vld [vmem:[%s6 + $0x2c0] sm:$0xff]
  %v11295 = vld [vmem:[%s6 + $0x2c8] sm:$0xff]
  %v11296 = vld [vmem:[%s6 + $0x2d0] sm:$0xff]
  %v11297 = vld [vmem:[%s6 + $0x2d8] sm:$0xff]
  %v11298 = vld [vmem:[%s6 + $0x2e0] sm:$0xff]
  %v11299 = vld [vmem:[%s6 + $0x2e8] sm:$0xff]
  %v11300 = vld [vmem:[%s6 + $0x2f0] sm:$0xff]
  %v11301 = vld [vmem:[%s6 + $0x2f8] sm:$0xff]
  %v11302 = vld [vmem:[%s6 + $0x300] sm:$0xff]
  %v11303 = vld [vmem:[%s6 + $0x308] sm:$0xff]
  %v11304 = vld [vmem:[%s6 + $0x310] sm:$0xff]
  %v11305 = vld [vmem:[%s6 + $0x318] sm:$0xff]
  %v11306 = vld [vmem:[%s6 + $0x320] sm:$0xff]
  %v11307 = vld [vmem:[%s6 + $0x328] sm:$0xff]
  %v11308 = vld [vmem:[%s6 + $0x330] sm:$0xff]
  %v11309 = vld [vmem:[%s6 + $0x338] sm:$0xff]
  %v11310 = vld [vmem:[%s6 + $0x340] sm:$0xff]
  %v11311 = vld [vmem:[%s6 + $0x348] sm:$0xff]
  %v11312 = vld [vmem:[%s6 + $0x350] sm:$0xff]
  %v11313 = vld [vmem:[%s6 + $0x358] sm:$0xff]
  %v11314 = vld [vmem:[%s6 + $0x360] sm:$0xff]
  %v11315 = vld [vmem:[%s6 + $0x368] sm:$0xff]
  %v11316 = vld [vmem:[%s6 + $0x370] sm:$0xff]
  %v11317 = vld [vmem:[%s6 + $0x378] sm:$0xff]
  %v11318 = vld [vmem:[%s6 + $0x380] sm:$0xff]
  %v11319 = vld [vmem:[%s6 + $0x388] sm:$0xff]
  %v11320 = vld [vmem:[%s6 + $0x390] sm:$0xff]
  %v11321 = vld [vmem:[%s6 + $0x398] sm:$0xff]
  %v11322 = vld [vmem:[%s6 + $0x3a0] sm:$0xff]
  %v11323 = vld [vmem:[%s6 + $0x3a8] sm:$0xff]
  %v11324 = vld [vmem:[%s6 + $0x3b0] sm:$0xff]
  %v11325 = vld [vmem:[%s6 + $0x3b8] sm:$0xff]
  %v11326 = vld [vmem:[%s6 + $0x3c0] sm:$0xff]
  %v11327 = vld [vmem:[%s6 + $0x3c8] sm:$0xff]
  %v11328 = vld [vmem:[%s6 + $0x3d0] sm:$0xff]
  %v11329 = vld [vmem:[%s6 + $0x3d8] sm:$0xff]
  %v11330 = vld [vmem:[%s6 + $0x3e0] sm:$0xff]
  %v11331 = vld [vmem:[%s6 + $0x3e8] sm:$0xff]
  %v11332 = vld [vmem:[%s6 + $0x3f0] sm:$0xff]
  %v11333 = vld [vmem:[%s6 + $0x3f8] sm:$0xff]
  %v11334 = vld [vmem:[%s6 + $0x400] sm:$0xff]
  %v11335 = vld [vmem:[%s6 + $0x408] sm:$0xff]
  %v11336 = vld [vmem:[%s6 + $0x410] sm:$0xff]
  %v11337 = vld [vmem:[%s6 + $0x418] sm:$0xff]
  %v11338 = vld [vmem:[%s6 + $0x420] sm:$0xff]
  %v11339 = vld [vmem:[%s6 + $0x428] sm:$0xff]
  %v11340 = vld [vmem:[%s6 + $0x430] sm:$0xff]
  %v11341 = vld [vmem:[%s6 + $0x438] sm:$0xff]
  %v11342 = vld [vmem:[%s6 + $0x440] sm:$0xff]
  %v11343 = vld [vmem:[%s6 + $0x448] sm:$0xff]
  %v11344 = vld [vmem:[%s6 + $0x450] sm:$0xff]
  %v11345 = vld [vmem:[%s6 + $0x458] sm:$0xff]
  %v11346 = vld [vmem:[%s6 + $0x460] sm:$0xff]
  %v11347 = vld [vmem:[%s6 + $0x468] sm:$0xff]
  %v11348 = vld [vmem:[%s6 + $0x470] sm:$0xff]
  %v11349 = vld [vmem:[%s6 + $0x478] sm:$0xff]
  %v11350 = vld [vmem:[%s6 + $0x480] sm:$0xff]
  %v11351 = vld [vmem:[%s6 + $0x488] sm:$0xff]
  %v11352 = vld [vmem:[%s6 + $0x490] sm:$0xff]
  %v11353 = vld [vmem:[%s6 + $0x498] sm:$0xff]
  %v11354 = vld [vmem:[%s6 + $0x4a0] sm:$0xff]
  %v11355 = vld [vmem:[%s6 + $0x4a8] sm:$0xff]
  %v11356 = vld [vmem:[%s6 + $0x4b0] sm:$0xff]
  %v11357 = vld [vmem:[%s6 + $0x4b8] sm:$0xff]
  %v11358 = vld [vmem:[%s6 + $0x4c0] sm:$0xff]
  %v11359 = vld [vmem:[%s6 + $0x4c8] sm:$0xff]
  %v11360 = vld [vmem:[%s6 + $0x4d0] sm:$0xff]
  %v11361 = vld [vmem:[%s6 + $0x4d8] sm:$0xff]
  %v11362 = vld [vmem:[%s6 + $0x4e0] sm:$0xff]
  %v11363 = vld [vmem:[%s6 + $0x4e8] sm:$0xff]
  %v11364 = vld [vmem:[%s6 + $0x4f0] sm:$0xff]
  %v11365 = vld [vmem:[%s6 + $0x4f8] sm:$0xff]
  %v11366 = vld [vmem:[%s6 + $0x500] sm:$0xff]
  %v11367 = vld [vmem:[%s6 + $0x508] sm:$0xff]
  %v11368 = vld [vmem:[%s6 + $0x510] sm:$0xff]
  %v11369 = vld [vmem:[%s6 + $0x518] sm:$0xff]
  %v11370 = vld [vmem:[%s6 + $0x520] sm:$0xff]
  %v11371 = vld [vmem:[%s6 + $0x528] sm:$0xff]
  %v11372 = vld [vmem:[%s6 + $0x530] sm:$0xff]
  %v11373 = vld [vmem:[%s6 + $0x538] sm:$0xff]
  %v11374 = vld [vmem:[%s6 + $0x540] sm:$0xff]
  %v11375 = vld [vmem:[%s6 + $0x548] sm:$0xff]
  %v11376 = vld [vmem:[%s6 + $0x550] sm:$0xff]
  %v11377 = vld [vmem:[%s6 + $0x558] sm:$0xff]
  %v11378 = vld [vmem:[%s6 + $0x560] sm:$0xff]
  %v11379 = vld [vmem:[%s6 + $0x568] sm:$0xff]
  %v11380 = vld [vmem:[%s6 + $0x570] sm:$0xff]
  %v11381 = vld [vmem:[%s6 + $0x578] sm:$0xff]
  %v11382 = vld [vmem:[%s6 + $0x580] sm:$0xff]
  %v11383 = vld [vmem:[%s6 + $0x588] sm:$0xff]
  %v11384 = vld [vmem:[%s6 + $0x590] sm:$0xff]
  %v11385 = vld [vmem:[%s6 + $0x598] sm:$0xff]
  %v11386 = vld [vmem:[%s6 + $0x5a0] sm:$0xff]
  %v11387 = vld [vmem:[%s6 + $0x5a8] sm:$0xff]
  %v11388 = vld [vmem:[%s6 + $0x5b0] sm:$0xff]
  %v11389 = vld [vmem:[%s6 + $0x5b8] sm:$0xff]
  %v11390 = vld [vmem:[%s6 + $0x5c0] sm:$0xff]
  %v11391 = vld [vmem:[%s6 + $0x5c8] sm:$0xff]
  %v11392 = vld [vmem:[%s6 + $0x5d0] sm:$0xff]
  %v11393 = vld [vmem:[%s6 + $0x5d8] sm:$0xff]
  %v11394 = vld [vmem:[%s6 + $0x5e0] sm:$0xff]
  %v11395 = vld [vmem:[%s6 + $0x5e8] sm:$0xff]
  %v11396 = vld [vmem:[%s6 + $0x5f0] sm:$0xff]
  %v11397 = vld [vmem:[%s6 + $0x5f8] sm:$0xff]
  %v11398 = vld [vmem:[%s6 + $0x600] sm:$0xff]
  %v11399 = vld [vmem:[%s6 + $0x608] sm:$0xff]
  %v11400 = vld [vmem:[%s6 + $0x610] sm:$0xff]
  %v11401 = vld [vmem:[%s6 + $0x618] sm:$0xff]
  %v11402 = vld [vmem:[%s6 + $0x620] sm:$0xff]
  %v11403 = vld [vmem:[%s6 + $0x628] sm:$0xff]
  %v11404 = vld [vmem:[%s6 + $0x630] sm:$0xff]
  %v11405 = vld [vmem:[%s6 + $0x638] sm:$0xff]
  %v11406 = vld [vmem:[%s7] sm:$0x1]
  %v11408 = vlaneseq
  %v11409 = vshrl.u32 %v11408, 7
  %v11410 = vsub.s32 0, %v11409
  %v11411 = vrot.slane %v11406, %v11410
  %vm11413 = vcmask 523264
  %v11415 = vsel %vm11413, %v11205, 0
  %11417 = vmatprep.subr.mxu0 0.0
  %11418 = vmatpush1.msra.mxu0 %v11221
  %11419 = vmatprep.subr.mxu0 0.0
  %11420 = vmatpush1.msra.mxu0 %v11220
  %11421 = vmatprep.subr.mxu0 0.0
  %11422 = vmatpush1.msra.mxu0 %v11219
  %11423 = vmatprep.subr.mxu0 0.0
  %11424 = vmatpush1.msra.mxu0 %v11218
  %11425 = vmatprep.subr.mxu0 0.0
  %11426 = vmatpush1.msra.mxu0 %v11217
  %11427 = vmatprep.subr.mxu0 0.0
  %11428 = vmatpush1.msra.mxu0 %v11216
  %11429 = vmatprep.subr.mxu0 0.0
  %11430 = vmatpush1.msra.mxu0 %v11215
  %11431 = vmatprep.subr.mxu0 0.0
  %11432 = vmatpush1.msra.mxu0 %v11214
  %11433 = vmatprep.subr.mxu0 0.0
  %11434 = vmatpush1.msra.mxu0 %v11213
  %11435 = vmatprep.subr.mxu0 0.0
  %11436 = vmatpush1.msra.mxu0 %v11212
  %11437 = vmatprep.subr.mxu0 0.0
  %11438 = vmatpush1.msra.mxu0 %v11211
  %11439 = vmatprep.subr.mxu0 0.0
  %11440 = vmatpush1.msra.mxu0 %v11210
  %11441 = vmatprep.subr.mxu0 0.0
  %11442 = vmatpush1.msra.mxu0 %v11209
  %11443 = vmatprep.subr.mxu0 0.0
  %11444 = vmatpush1.msra.mxu0 %v11208
  %11445 = vmatprep.subr.mxu0 0.0
  %11446 = vmatpush1.msra.mxu0 %v11207
  %11447 = vmatprep.subr.mxu0 0.0
  %11448 = vmatpush1.msra.mxu0 %v11206
  %11449 = vmatprep.subr.mxu0 0.0
  %11450 = vmatpush2.msra.mxu0 %v11237
  %11451 = vmatprep.subr.mxu0 0.0
  %11452 = vmatpush2.msra.mxu0 %v11236
  %11453 = vmatprep.subr.mxu0 0.0
  %11454 = vmatpush2.msra.mxu0 %v11235
  %11455 = vmatprep.subr.mxu0 0.0
  %11456 = vmatpush2.msra.mxu0 %v11234
  %11457 = vmatprep.subr.mxu0 0.0
  %11458 = vmatpush2.msra.mxu0 %v11233
  %11459 = vmatprep.subr.mxu0 0.0
  %11460 = vmatpush2.msra.mxu0 %v11232
  %11461 = vmatprep.subr.mxu0 0.0
  %11462 = vmatpush2.msra.mxu0 %v11231
  %11463 = vmatprep.subr.mxu0 0.0
  %11464 = vmatpush2.msra.mxu0 %v11230
  %11465 = vmatprep.subr.mxu0 0.0
  %11466 = vmatpush2.msra.mxu0 %v11229
  %11467 = vmatprep.subr.mxu0 0.0
  %11468 = vmatpush2.msra.mxu0 %v11228
  %11469 = vmatprep.subr.mxu0 0.0
  %11470 = vmatpush2.msra.mxu0 %v11227
  %11471 = vmatprep.subr.mxu0 0.0
  %11472 = vmatpush2.msra.mxu0 %v11226
  %11473 = vmatprep.subr.mxu0 0.0
  %11474 = vmatpush2.msra.mxu0 %v11225
  %11475 = vmatprep.subr.mxu0 0.0
  %11476 = vmatpush2.msra.mxu0 %v11224
  %11477 = vmatprep.subr.mxu0 0.0
  %11478 = vmatpush2.msra.mxu0 %v11223
  %11479 = vmatprep.subr.mxu0 0.0
  %11480 = vmatpush2.msra.mxu0 %v11222
  %11481 = vmatprep.mubr.f32.mxu0 %v11194
  %11482 = vmatmul.mubr.f32.gmra.mxu0 %v11193
  %v11483 = vpop.f32.mrf.mxu0
  %v11484 = vadd.f32 %v11411, %v11483
  %v11485 = vpop.f32.mrf.mxu0
  %11486 = vdwg.mxu0
  %11487 = vmatprep.subr.mxu0 0.0
  %11488 = vmatpush1.msra.mxu0 %v11253
  %11489 = vmatprep.subr.mxu0 0.0
  %11490 = vmatpush1.msra.mxu0 %v11252
  %11491 = vmatprep.subr.mxu0 0.0
  %11492 = vmatpush1.msra.mxu0 %v11251
  %11493 = vmatprep.subr.mxu0 0.0
  %11494 = vmatpush1.msra.mxu0 %v11250
  %11495 = vmatprep.subr.mxu0 0.0
  %11496 = vmatpush1.msra.mxu0 %v11249
  %11497 = vmatprep.subr.mxu0 0.0
  %11498 = vmatpush1.msra.mxu0 %v11248
  %11499 = vmatprep.subr.mxu0 0.0
  %11500 = vmatpush1.msra.mxu0 %v11247
  %11501 = vmatprep.subr.mxu0 0.0
  %11502 = vmatpush1.msra.mxu0 %v11246
  %11503 = vmatprep.subr.mxu0 0.0
  %11504 = vmatpush1.msra.mxu0 %v11245
  %11505 = vmatprep.subr.mxu0 0.0
  %11506 = vmatpush1.msra.mxu0 %v11244
  %11507 = vmatprep.subr.mxu0 0.0
  %11508 = vmatpush1.msra.mxu0 %v11243
  %11509 = vmatprep.subr.mxu0 0.0
  %11510 = vmatpush1.msra.mxu0 %v11242
  %11511 = vmatprep.subr.mxu0 0.0
  %11512 = vmatpush1.msra.mxu0 %v11241
  %11513 = vmatprep.subr.mxu0 0.0
  %11514 = vmatpush1.msra.mxu0 %v11240
  %11515 = vmatprep.subr.mxu0 0.0
  %11516 = vmatpush1.msra.mxu0 %v11239
  %11517 = vmatprep.subr.mxu0 0.0
  %11518 = vmatpush1.msra.mxu0 %v11238
  %11519 = vmatprep.subr.mxu0 0.0
  %11520 = vmatpush2.msra.mxu0 %v11269
  %11521 = vmatprep.subr.mxu0 0.0
  %11522 = vmatpush2.msra.mxu0 %v11268
  %11523 = vmatprep.subr.mxu0 0.0
  %11524 = vmatpush2.msra.mxu0 %v11267
  %11525 = vmatprep.subr.mxu0 0.0
  %11526 = vmatpush2.msra.mxu0 %v11266
  %11527 = vmatprep.subr.mxu0 0.0
  %11528 = vmatpush2.msra.mxu0 %v11265
  %11529 = vmatprep.subr.mxu0 0.0
  %11530 = vmatpush2.msra.mxu0 %v11264
  %11531 = vmatprep.subr.mxu0 0.0
  %11532 = vmatpush2.msra.mxu0 %v11263
  %11533 = vmatprep.subr.mxu0 0.0
  %11534 = vmatpush2.msra.mxu0 %v11262
  %11535 = vmatprep.subr.mxu0 0.0
  %11536 = vmatpush2.msra.mxu0 %v11261
  %11537 = vmatprep.subr.mxu0 0.0
  %11538 = vmatpush2.msra.mxu0 %v11260
  %11539 = vmatprep.subr.mxu0 0.0
  %11540 = vmatpush2.msra.mxu0 %v11259
  %11541 = vmatprep.subr.mxu0 0.0
  %11542 = vmatpush2.msra.mxu0 %v11258
  %11543 = vmatprep.subr.mxu0 0.0
  %11544 = vmatpush2.msra.mxu0 %v11257
  %11545 = vmatprep.subr.mxu0 0.0
  %11546 = vmatpush2.msra.mxu0 %v11256
  %11547 = vmatprep.subr.mxu0 0.0
  %11548 = vmatpush2.msra.mxu0 %v11255
  %11549 = vmatprep.subr.mxu0 0.0
  %11550 = vmatpush2.msra.mxu0 %v11254
  %11551 = vmatprep.mubr.f32.mxu0 %v11196
  %11552 = vmatmul.mubr.f32.gmra.mxu0 %v11195
  %v11553 = vpop.f32.mrf.mxu0
  %v11554 = vadd.f32 %v11484, %v11553
  %v11555 = vpop.f32.mrf.mxu0
  %11556 = vdwg.mxu0
  %11557 = vmatprep.subr.mxu0 0.0
  %11558 = vmatpush1.msra.mxu0 %v11285
  %11559 = vmatprep.subr.mxu0 0.0
  %11560 = vmatpush1.msra.mxu0 %v11284
  %11561 = vmatprep.subr.mxu0 0.0
  %11562 = vmatpush1.msra.mxu0 %v11283
  %11563 = vmatprep.subr.mxu0 0.0
  %11564 = vmatpush1.msra.mxu0 %v11282
  %11565 = vmatprep.subr.mxu0 0.0
  %11566 = vmatpush1.msra.mxu0 %v11281
  %11567 = vmatprep.subr.mxu0 0.0
  %11568 = vmatpush1.msra.mxu0 %v11280
  %11569 = vmatprep.subr.mxu0 0.0
  %11570 = vmatpush1.msra.mxu0 %v11279
  %11571 = vmatprep.subr.mxu0 0.0
  %11572 = vmatpush1.msra.mxu0 %v11278
  %11573 = vmatprep.subr.mxu0 0.0
  %11574 = vmatpush1.msra.mxu0 %v11277
  %11575 = vmatprep.subr.mxu0 0.0
  %11576 = vmatpush1.msra.mxu0 %v11276
  %11577 = vmatprep.subr.mxu0 0.0
  %11578 = vmatpush1.msra.mxu0 %v11275
  %11579 = vmatprep.subr.mxu0 0.0
  %11580 = vmatpush1.msra.mxu0 %v11274
  %11581 = vmatprep.subr.mxu0 0.0
  %11582 = vmatpush1.msra.mxu0 %v11273
  %11583 = vmatprep.subr.mxu0 0.0
  %11584 = vmatpush1.msra.mxu0 %v11272
  %11585 = vmatprep.subr.mxu0 0.0
  %11586 = vmatpush1.msra.mxu0 %v11271
  %11587 = vmatprep.subr.mxu0 0.0
  %11588 = vmatpush1.msra.mxu0 %v11270
  %11589 = vmatprep.subr.mxu0 0.0
  %11590 = vmatpush2.msra.mxu0 %v11301
  %11591 = vmatprep.subr.mxu0 0.0
  %11592 = vmatpush2.msra.mxu0 %v11300
  %11593 = vmatprep.subr.mxu0 0.0
  %11594 = vmatpush2.msra.mxu0 %v11299
  %11595 = vmatprep.subr.mxu0 0.0
  %11596 = vmatpush2.msra.mxu0 %v11298
  %11597 = vmatprep.subr.mxu0 0.0
  %11598 = vmatpush2.msra.mxu0 %v11297
  %11599 = vmatprep.subr.mxu0 0.0
  %11600 = vmatpush2.msra.mxu0 %v11296
  %11601 = vmatprep.subr.mxu0 0.0
  %11602 = vmatpush2.msra.mxu0 %v11295
  %11603 = vmatprep.subr.mxu0 0.0
  %11604 = vmatpush2.msra.mxu0 %v11294
  %11605 = vmatprep.subr.mxu0 0.0
  %11606 = vmatpush2.msra.mxu0 %v11293
  %11607 = vmatprep.subr.mxu0 0.0
  %11608 = vmatpush2.msra.mxu0 %v11292
  %11609 = vmatprep.subr.mxu0 0.0
  %11610 = vmatpush2.msra.mxu0 %v11291
  %11611 = vmatprep.subr.mxu0 0.0
  %11612 = vmatpush2.msra.mxu0 %v11290
  %11613 = vmatprep.subr.mxu0 0.0
  %11614 = vmatpush2.msra.mxu0 %v11289
  %11615 = vmatprep.subr.mxu0 0.0
  %11616 = vmatpush2.msra.mxu0 %v11288
  %11617 = vmatprep.subr.mxu0 0.0
  %11618 = vmatpush2.msra.mxu0 %v11287
  %11619 = vmatprep.subr.mxu0 0.0
  %11620 = vmatpush2.msra.mxu0 %v11286
  %11621 = vmatprep.mubr.f32.mxu0 %v11198
  %11622 = vmatmul.mubr.f32.gmra.mxu0 %v11197
  %v11623 = vpop.f32.mrf.mxu0
  %v11624 = vadd.f32 %v11554, %v11623
  %v11625 = vpop.f32.mrf.mxu0
  %11626 = vdwg.mxu0
  %11627 = vmatprep.subr.mxu0 0.0
  %11628 = vmatpush1.msra.mxu0 %v11317
  %11629 = vmatprep.subr.mxu0 0.0
  %11630 = vmatpush1.msra.mxu0 %v11316
  %11631 = vmatprep.subr.mxu0 0.0
  %11632 = vmatpush1.msra.mxu0 %v11315
  %11633 = vmatprep.subr.mxu0 0.0
  %11634 = vmatpush1.msra.mxu0 %v11314
  %11635 = vmatprep.subr.mxu0 0.0
  %11636 = vmatpush1.msra.mxu0 %v11313
  %11637 = vmatprep.subr.mxu0 0.0
  %11638 = vmatpush1.msra.mxu0 %v11312
  %11639 = vmatprep.subr.mxu0 0.0
  %11640 = vmatpush1.msra.mxu0 %v11311
  %11641 = vmatprep.subr.mxu0 0.0
  %11642 = vmatpush1.msra.mxu0 %v11310
  %11643 = vmatprep.subr.mxu0 0.0
  %11644 = vmatpush1.msra.mxu0 %v11309
  %11645 = vmatprep.subr.mxu0 0.0
  %11646 = vmatpush1.msra.mxu0 %v11308
  %11647 = vmatprep.subr.mxu0 0.0
  %11648 = vmatpush1.msra.mxu0 %v11307
  %11649 = vmatprep.subr.mxu0 0.0
  %11650 = vmatpush1.msra.mxu0 %v11306
  %11651 = vmatprep.subr.mxu0 0.0
  %11652 = vmatpush1.msra.mxu0 %v11305
  %11653 = vmatprep.subr.mxu0 0.0
  %11654 = vmatpush1.msra.mxu0 %v11304
  %11655 = vmatprep.subr.mxu0 0.0
  %11656 = vmatpush1.msra.mxu0 %v11303
  %11657 = vmatprep.subr.mxu0 0.0
  %11658 = vmatpush1.msra.mxu0 %v11302
  %11659 = vmatprep.subr.mxu0 0.0
  %11660 = vmatpush2.msra.mxu0 %v11333
  %11661 = vmatprep.subr.mxu0 0.0
  %11662 = vmatpush2.msra.mxu0 %v11332
  %11663 = vmatprep.subr.mxu0 0.0
  %11664 = vmatpush2.msra.mxu0 %v11331
  %11665 = vmatprep.subr.mxu0 0.0
  %11666 = vmatpush2.msra.mxu0 %v11330
  %11667 = vmatprep.subr.mxu0 0.0
  %11668 = vmatpush2.msra.mxu0 %v11329
  %11669 = vmatprep.subr.mxu0 0.0
  %11670 = vmatpush2.msra.mxu0 %v11328
  %11671 = vmatprep.subr.mxu0 0.0
  %11672 = vmatpush2.msra.mxu0 %v11327
  %11673 = vmatprep.subr.mxu0 0.0
  %11674 = vmatpush2.msra.mxu0 %v11326
  %11675 = vmatprep.subr.mxu0 0.0
  %11676 = vmatpush2.msra.mxu0 %v11325
  %11677 = vmatprep.subr.mxu0 0.0
  %11678 = vmatpush2.msra.mxu0 %v11324
  %11679 = vmatprep.subr.mxu0 0.0
  %11680 = vmatpush2.msra.mxu0 %v11323
  %11681 = vmatprep.subr.mxu0 0.0
  %11682 = vmatpush2.msra.mxu0 %v11322
  %11683 = vmatprep.subr.mxu0 0.0
  %11684 = vmatpush2.msra.mxu0 %v11321
  %11685 = vmatprep.subr.mxu0 0.0
  %11686 = vmatpush2.msra.mxu0 %v11320
  %11687 = vmatprep.subr.mxu0 0.0
  %11688 = vmatpush2.msra.mxu0 %v11319
  %11689 = vmatprep.subr.mxu0 0.0
  %11690 = vmatpush2.msra.mxu0 %v11318
  %11691 = vmatprep.mubr.f32.mxu0 %v11200
  %11692 = vmatmul.mubr.f32.gmra.mxu0 %v11199
  %v11693 = vpop.f32.mrf.mxu0
  %v11694 = vadd.f32 %v11624, %v11693
  %v11695 = vpop.f32.mrf.mxu0
  %11696 = vdwg.mxu0
  %11697 = vmatprep.subr.mxu0 0.0
  %11698 = vmatpush1.msra.mxu0 %v11349
  %11699 = vmatprep.subr.mxu0 0.0
  %11700 = vmatpush1.msra.mxu0 %v11348
  %11701 = vmatprep.subr.mxu0 0.0
  %11702 = vmatpush1.msra.mxu0 %v11347
  %11703 = vmatprep.subr.mxu0 0.0
  %11704 = vmatpush1.msra.mxu0 %v11346
  %11705 = vmatprep.subr.mxu0 0.0
  %11706 = vmatpush1.msra.mxu0 %v11345
  %11707 = vmatprep.subr.mxu0 0.0
  %11708 = vmatpush1.msra.mxu0 %v11344
  %11709 = vmatprep.subr.mxu0 0.0
  %11710 = vmatpush1.msra.mxu0 %v11343
  %11711 = vmatprep.subr.mxu0 0.0
  %11712 = vmatpush1.msra.mxu0 %v11342
  %11713 = vmatprep.subr.mxu0 0.0
  %11714 = vmatpush1.msra.mxu0 %v11341
  %11715 = vmatprep.subr.mxu0 0.0
  %11716 = vmatpush1.msra.mxu0 %v11340
  %11717 = vmatprep.subr.mxu0 0.0
  %11718 = vmatpush1.msra.mxu0 %v11339
  %11719 = vmatprep.subr.mxu0 0.0
  %11720 = vmatpush1.msra.mxu0 %v11338
  %11721 = vmatprep.subr.mxu0 0.0
  %11722 = vmatpush1.msra.mxu0 %v11337
  %11723 = vmatprep.subr.mxu0 0.0
  %11724 = vmatpush1.msra.mxu0 %v11336
  %11725 = vmatprep.subr.mxu0 0.0
  %11726 = vmatpush1.msra.mxu0 %v11335
  %11727 = vmatprep.subr.mxu0 0.0
  %11728 = vmatpush1.msra.mxu0 %v11334
  %11729 = vmatprep.subr.mxu0 0.0
  %11730 = vmatpush2.msra.mxu0 %v11365
  %11731 = vmatprep.subr.mxu0 0.0
  %11732 = vmatpush2.msra.mxu0 %v11364
  %11733 = vmatprep.subr.mxu0 0.0
  %11734 = vmatpush2.msra.mxu0 %v11363
  %11735 = vmatprep.subr.mxu0 0.0
  %11736 = vmatpush2.msra.mxu0 %v11362
  %11737 = vmatprep.subr.mxu0 0.0
  %11738 = vmatpush2.msra.mxu0 %v11361
  %11739 = vmatprep.subr.mxu0 0.0
  %11740 = vmatpush2.msra.mxu0 %v11360
  %11741 = vmatprep.subr.mxu0 0.0
  %11742 = vmatpush2.msra.mxu0 %v11359
  %11743 = vmatprep.subr.mxu0 0.0
  %11744 = vmatpush2.msra.mxu0 %v11358
  %11745 = vmatprep.subr.mxu0 0.0
  %11746 = vmatpush2.msra.mxu0 %v11357
  %11747 = vmatprep.subr.mxu0 0.0
  %11748 = vmatpush2.msra.mxu0 %v11356
  %11749 = vmatprep.subr.mxu0 0.0
  %11750 = vmatpush2.msra.mxu0 %v11355
  %11751 = vmatprep.subr.mxu0 0.0
  %11752 = vmatpush2.msra.mxu0 %v11354
  %11753 = vmatprep.subr.mxu0 0.0
  %11754 = vmatpush2.msra.mxu0 %v11353
  %11755 = vmatprep.subr.mxu0 0.0
  %11756 = vmatpush2.msra.mxu0 %v11352
  %11757 = vmatprep.subr.mxu0 0.0
  %11758 = vmatpush2.msra.mxu0 %v11351
  %11759 = vmatprep.subr.mxu0 0.0
  %11760 = vmatpush2.msra.mxu0 %v11350
  %11761 = vmatprep.mubr.f32.mxu0 %v11202
  %11762 = vmatmul.mubr.f32.gmra.mxu0 %v11201
  %v11763 = vpop.f32.mrf.mxu0
  %v11764 = vadd.f32 %v11694, %v11763
  %v11765 = vpop.f32.mrf.mxu0
  %11766 = vdwg.mxu0
  %11767 = vmatprep.subr.mxu0 0.0
  %11768 = vmatpush1.msra.mxu0 %v11381
  %11769 = vmatprep.subr.mxu0 0.0
  %11770 = vmatpush1.msra.mxu0 %v11380
  %11771 = vmatprep.subr.mxu0 0.0
  %11772 = vmatpush1.msra.mxu0 %v11379
  %11773 = vmatprep.subr.mxu0 0.0
  %11774 = vmatpush1.msra.mxu0 %v11378
  %11775 = vmatprep.subr.mxu0 0.0
  %11776 = vmatpush1.msra.mxu0 %v11377
  %11777 = vmatprep.subr.mxu0 0.0
  %11778 = vmatpush1.msra.mxu0 %v11376
  %11779 = vmatprep.subr.mxu0 0.0
  %11780 = vmatpush1.msra.mxu0 %v11375
  %11781 = vmatprep.subr.mxu0 0.0
  %11782 = vmatpush1.msra.mxu0 %v11374
  %11783 = vmatprep.subr.mxu0 0.0
  %11784 = vmatpush1.msra.mxu0 %v11373
  %11785 = vmatprep.subr.mxu0 0.0
  %11786 = vmatpush1.msra.mxu0 %v11372
  %11787 = vmatprep.subr.mxu0 0.0
  %11788 = vmatpush1.msra.mxu0 %v11371
  %11789 = vmatprep.subr.mxu0 0.0
  %11790 = vmatpush1.msra.mxu0 %v11370
  %11791 = vmatprep.subr.mxu0 0.0
  %11792 = vmatpush1.msra.mxu0 %v11369
  %11793 = vmatprep.subr.mxu0 0.0
  %11794 = vmatpush1.msra.mxu0 %v11368
  %11795 = vmatprep.subr.mxu0 0.0
  %11796 = vmatpush1.msra.mxu0 %v11367
  %11797 = vmatprep.subr.mxu0 0.0
  %11798 = vmatpush1.msra.mxu0 %v11366
  %11799 = vmatprep.subr.mxu0 0.0
  %11800 = vmatpush2.msra.mxu0 %v11397
  %11801 = vmatprep.subr.mxu0 0.0
  %11802 = vmatpush2.msra.mxu0 %v11396
  %11803 = vmatprep.subr.mxu0 0.0
  %11804 = vmatpush2.msra.mxu0 %v11395
  %11805 = vmatprep.subr.mxu0 0.0
  %11806 = vmatpush2.msra.mxu0 %v11394
  %11807 = vmatprep.subr.mxu0 0.0
  %11808 = vmatpush2.msra.mxu0 %v11393
  %11809 = vmatprep.subr.mxu0 0.0
  %11810 = vmatpush2.msra.mxu0 %v11392
  %11811 = vmatprep.subr.mxu0 0.0
  %11812 = vmatpush2.msra.mxu0 %v11391
  %11813 = vmatprep.subr.mxu0 0.0
  %11814 = vmatpush2.msra.mxu0 %v11390
  %11815 = vmatprep.subr.mxu0 0.0
  %11816 = vmatpush2.msra.mxu0 %v11389
  %11817 = vmatprep.subr.mxu0 0.0
  %11818 = vmatpush2.msra.mxu0 %v11388
  %11819 = vmatprep.subr.mxu0 0.0
  %11820 = vmatpush2.msra.mxu0 %v11387
  %11821 = vmatprep.subr.mxu0 0.0
  %11822 = vmatpush2.msra.mxu0 %v11386
  %11823 = vmatprep.subr.mxu0 0.0
  %11824 = vmatpush2.msra.mxu0 %v11385
  %11825 = vmatprep.subr.mxu0 0.0
  %11826 = vmatpush2.msra.mxu0 %v11384
  %11827 = vmatprep.subr.mxu0 0.0
  %11828 = vmatpush2.msra.mxu0 %v11383
  %11829 = vmatprep.subr.mxu0 0.0
  %11830 = vmatpush2.msra.mxu0 %v11382
  %11831 = vmatprep.mubr.f32.mxu0 %v11204
  %11832 = vmatmul.mubr.f32.gmra.mxu0 %v11203
  %v11833 = vpop.f32.mrf.mxu0
  %v11834 = vadd.f32 %v11764, %v11833
  %v11835 = vpop.f32.mrf.mxu0
  %11836 = vdwg.mxu0
  %11837 = vmatprep.subr.mxu0 0.0
  %11838 = vmatpush1.msra.mxu0 0.0
  %11839 = vmatprep.subr.mxu0 0.0
  %11840 = vmatpush1.msra.mxu0 0.0
  %11841 = vmatprep.subr.mxu0 0.0
  %11842 = vmatpush1.msra.mxu0 0.0
  %11843 = vmatprep.subr.mxu0 0.0
  %11844 = vmatpush1.msra.mxu0 0.0
  %11845 = vmatprep.subr.mxu0 0.0
  %11846 = vmatpush1.msra.mxu0 0.0
  %11847 = vmatprep.subr.mxu0 0.0
  %11848 = vmatpush1.msra.mxu0 0.0
  %11849 = vmatprep.subr.mxu0 0.0
  %11850 = vmatpush1.msra.mxu0 0.0
  %11851 = vmatprep.subr.mxu0 0.0
  %11852 = vmatpush1.msra.mxu0 0.0
  %11853 = vmatprep.subr.mxu0 0.0
  %11854 = vmatpush1.msra.mxu0 %v11405
  %11855 = vmatprep.subr.mxu0 0.0
  %11856 = vmatpush1.msra.mxu0 %v11404
  %11857 = vmatprep.subr.mxu0 0.0
  %11858 = vmatpush1.msra.mxu0 %v11403
  %11859 = vmatprep.subr.mxu0 0.0
  %11860 = vmatpush1.msra.mxu0 %v11402
  %11861 = vmatprep.subr.mxu0 0.0
  %11862 = vmatpush1.msra.mxu0 %v11401
  %11863 = vmatprep.subr.mxu0 0.0
  %11864 = vmatpush1.msra.mxu0 %v11400
  %11865 = vmatprep.subr.mxu0 0.0
  %11866 = vmatpush1.msra.mxu0 %v11399
  %11867 = vmatprep.subr.mxu0 0.0
  %11868 = vmatpush1.msra.mxu0 %v11398
  %11869 = vmatprep.subr.mxu0 0.0
  %11870 = vmatpush2.msra.mxu0 0.0
  %11871 = vmatprep.subr.mxu0 0.0
  %11872 = vmatpush2.msra.mxu0 0.0
  %11873 = vmatprep.subr.mxu0 0.0
  %11874 = vmatpush2.msra.mxu0 0.0
  %11875 = vmatprep.subr.mxu0 0.0
  %11876 = vmatpush2.msra.mxu0 0.0
  %11877 = vmatprep.subr.mxu0 0.0
  %11878 = vmatpush2.msra.mxu0 0.0
  %11879 = vmatprep.subr.mxu0 0.0
  %11880 = vmatpush2.msra.mxu0 0.0
  %11881 = vmatprep.subr.mxu0 0.0
  %11882 = vmatpush2.msra.mxu0 0.0
  %11883 = vmatprep.subr.mxu0 0.0
  %11884 = vmatpush2.msra.mxu0 0.0
  %11885 = vmatprep.subr.mxu0 0.0
  %11886 = vmatpush2.msra.mxu0 0.0
  %11887 = vmatprep.subr.mxu0 0.0
  %11888 = vmatpush2.msra.mxu0 0.0
  %11889 = vmatprep.subr.mxu0 0.0
  %11890 = vmatpush2.msra.mxu0 0.0
  %11891 = vmatprep.subr.mxu0 0.0
  %11892 = vmatpush2.msra.mxu0 0.0
  %11893 = vmatprep.subr.mxu0 0.0
  %11894 = vmatpush2.msra.mxu0 0.0
  %11895 = vmatprep.subr.mxu0 0.0
  %11896 = vmatpush2.msra.mxu0 0.0
  %11897 = vmatprep.subr.mxu0 0.0
  %11898 = vmatpush2.msra.mxu0 0.0
  %11899 = vmatprep.subr.mxu0 0.0
  %11900 = vmatpush2.msra.mxu0 0.0
  %11901 = vmatprep.mubr.f32.mxu0 0.0
  %11902 = vmatmul.mubr.f32.gmra.mxu0 %v11415
  %v11903 = vpop.f32.mrf.mxu0
  %v11904 = vadd.f32 %v11834, %v11903
  %v11905 = vpop.f32.mrf.mxu0
  %11906 = vdwg.mxu0
  %v11907 = vmax.f32 %v11904, 0.0
  %v11908 = vld [vmem:[%s8] sm:$0xff]
  %v11909 = vld [vmem:[%s8 + $0x8] sm:$0xff]
  %v11910 = vld [vmem:[%s8 + $0x10] sm:$0xff]
  %v11911 = vld [vmem:[%s8 + $0x18] sm:$0xff]
  %v11912 = vld [vmem:[%s8 + $0x20] sm:$0xff]
  %v11913 = vld [vmem:[%s8 + $0x28] sm:$0xff]
  %v11914 = vld [vmem:[%s8 + $0x30] sm:$0xff]
  %v11915 = vld [vmem:[%s8 + $0x38] sm:$0xff]
  %v11916 = vld [vmem:[%s8 + $0x40] sm:$0xff]
  %v11917 = vld [vmem:[%s8 + $0x48] sm:$0xff]
  %v11918 = vld [vmem:[%s8 + $0x50] sm:$0xff]
  %v11919 = vld [vmem:[%s8 + $0x58] sm:$0xff]
  %v11920 = vld [vmem:[%s8 + $0x60] sm:$0xff]
  %v11921 = vld [vmem:[%s8 + $0x68] sm:$0xff]
  %v11922 = vld [vmem:[%s8 + $0x70] sm:$0xff]
  %v11923 = vld [vmem:[%s8 + $0x78] sm:$0xff]
  %v11924 = vld [vmem:[%s9] sm:$0x1]
  %v11926 = vlaneseq
  %v11927 = vshrl.u32 %v11926, 7
  %v11928 = vsub.s32 0, %v11927
  %v11929 = vrot.slane %v11924, %v11928
  %11931 = vmatprep.subr.mxu0 0.0
  %11932 = vmatpush1.msra.mxu0 %v11923
  %11933 = vmatprep.subr.mxu0 0.0
  %11934 = vmatpush1.msra.mxu0 %v11922
  %11935 = vmatprep.subr.mxu0 0.0
  %11936 = vmatpush1.msra.mxu0 %v11921
  %11937 = vmatprep.subr.mxu0 0.0
  %11938 = vmatpush1.msra.mxu0 %v11920
  %11939 = vmatprep.subr.mxu0 0.0
  %11940 = vmatpush1.msra.mxu0 %v11919
  %11941 = vmatprep.subr.mxu0 0.0
  %11942 = vmatpush1.msra.mxu0 %v11918
  %11943 = vmatprep.subr.mxu0 0.0
  %11944 = vmatpush1.msra.mxu0 %v11917
  %11945 = vmatprep.subr.mxu0 0.0
  %11946 = vmatpush1.msra.mxu0 %v11916
  %11947 = vmatprep.subr.mxu0 0.0
  %11948 = vmatpush1.msra.mxu0 %v11915
  %11949 = vmatprep.subr.mxu0 0.0
  %11950 = vmatpush1.msra.mxu0 %v11914
  %11951 = vmatprep.subr.mxu0 0.0
  %11952 = vmatpush1.msra.mxu0 %v11913
  %11953 = vmatprep.subr.mxu0 0.0
  %11954 = vmatpush1.msra.mxu0 %v11912
  %11955 = vmatprep.subr.mxu0 0.0
  %11956 = vmatpush1.msra.mxu0 %v11911
  %11957 = vmatprep.subr.mxu0 0.0
  %11958 = vmatpush1.msra.mxu0 %v11910
  %11959 = vmatprep.subr.mxu0 0.0
  %11960 = vmatpush1.msra.mxu0 %v11909
  %11961 = vmatprep.subr.mxu0 0.0
  %11962 = vmatpush1.msra.mxu0 %v11908
  %11963 = vmatprep.subr.mxu0 0.0
  %11964 = vmatpush2.msra.mxu0 0.0
  %11965 = vmatprep.subr.mxu0 0.0
  %11966 = vmatpush2.msra.mxu0 0.0
  %11967 = vmatprep.subr.mxu0 0.0
  %11968 = vmatpush2.msra.mxu0 0.0
  %11969 = vmatprep.subr.mxu0 0.0
  %11970 = vmatpush2.msra.mxu0 0.0
  %11971 = vmatprep.subr.mxu0 0.0
  %11972 = vmatpush2.msra.mxu0 0.0
  %11973 = vmatprep.subr.mxu0 0.0
  %11974 = vmatpush2.msra.mxu0 0.0
  %11975 = vmatprep.subr.mxu0 0.0
  %11976 = vmatpush2.msra.mxu0 0.0
  %11977 = vmatprep.subr.mxu0 0.0
  %11978 = vmatpush2.msra.mxu0 0.0
  %11979 = vmatprep.subr.mxu0 0.0
  %11980 = vmatpush2.msra.mxu0 0.0
  %11981 = vmatprep.subr.mxu0 0.0
  %11982 = vmatpush2.msra.mxu0 0.0
  %11983 = vmatprep.subr.mxu0 0.0
  %11984 = vmatpush2.msra.mxu0 0.0
  %11985 = vmatprep.subr.mxu0 0.0
  %11986 = vmatpush2.msra.mxu0 0.0
  %11987 = vmatprep.subr.mxu0 0.0
  %11988 = vmatpush2.msra.mxu0 0.0
  %11989 = vmatprep.subr.mxu0 0.0
  %11990 = vmatpush2.msra.mxu0 0.0
  %11991 = vmatprep.subr.mxu0 0.0
  %11992 = vmatpush2.msra.mxu0 0.0
  %11993 = vmatprep.subr.mxu0 0.0
  %11994 = vmatpush2.msra.mxu0 0.0
  %11995 = vmatprep.mubr.f32.mxu0 0.0
  %11996 = vmatmul.mubr.f32.gmra.mxu0 %v11907
  %v11997 = vpop.f32.mrf.mxu0
  %v11998 = vadd.f32 %v11929, %v11997
  %v11999 = vpop.f32.mrf.mxu0
  %12000 = vdwg.mxu0
  %v12001 = vmax.f32 %v11998, 0.0
  %v12002 = vld [vmem:[%s10] sm:$0xff]
  %v12003 = vld [vmem:[%s10 + $0x8] sm:$0xff]
  %v12004 = vld [vmem:[%s10 + $0x10] sm:$0xff]
  %v12005 = vld [vmem:[%s10 + $0x18] sm:$0xff]
  %v12006 = vld [vmem:[%s10 + $0x20] sm:$0xff]
  %v12007 = vld [vmem:[%s10 + $0x28] sm:$0xff]
  %v12008 = vld [vmem:[%s10 + $0x30] sm:$0xff]
  %v12009 = vld [vmem:[%s10 + $0x38] sm:$0xff]
  %v12010 = vld [vmem:[%s10 + $0x40] sm:$0xff]
  %v12011 = vld [vmem:[%s10 + $0x48] sm:$0xff]
  %v12012 = vld [vmem:[%s10 + $0x50] sm:$0xff]
  %v12013 = vld [vmem:[%s10 + $0x58] sm:$0xff]
  %v12014 = vld [vmem:[%s10 + $0x60] sm:$0xff]
  %v12015 = vld [vmem:[%s10 + $0x68] sm:$0xff]
  %v12016 = vld [vmem:[%s10 + $0x70] sm:$0xff]
  %v12017 = vld [vmem:[%s10 + $0x78] sm:$0xff]
  %v12018 = vld [vmem:[%s11] sm:$0x1]
  %v12020 = vlaneseq
  %v12021 = vshrl.u32 %v12020, 7
  %v12022 = vsub.s32 0, %v12021
  %v12023 = vrot.slane %v12018, %v12022
  %12025 = vmatprep.subr.mxu0 0.0
  %12026 = vmatpush1.msra.mxu0 %v12017
  %12027 = vmatprep.subr.mxu0 0.0
  %12028 = vmatpush1.msra.mxu0 %v12016
  %12029 = vmatprep.subr.mxu0 0.0
  %12030 = vmatpush1.msra.mxu0 %v12015
  %12031 = vmatprep.subr.mxu0 0.0
  %12032 = vmatpush1.msra.mxu0 %v12014
  %12033 = vmatprep.subr.mxu0 0.0
  %12034 = vmatpush1.msra.mxu0 %v12013
  %12035 = vmatprep.subr.mxu0 0.0
  %12036 = vmatpush1.msra.mxu0 %v12012
  %12037 = vmatprep.subr.mxu0 0.0
  %12038 = vmatpush1.msra.mxu0 %v12011
  %12039 = vmatprep.subr.mxu0 0.0
  %12040 = vmatpush1.msra.mxu0 %v12010
  %12041 = vmatprep.subr.mxu0 0.0
  %12042 = vmatpush1.msra.mxu0 %v12009
  %12043 = vmatprep.subr.mxu0 0.0
  %12044 = vmatpush1.msra.mxu0 %v12008
  %12045 = vmatprep.subr.mxu0 0.0
  %12046 = vmatpush1.msra.mxu0 %v12007
  %12047 = vmatprep.subr.mxu0 0.0
  %12048 = vmatpush1.msra.mxu0 %v12006
  %12049 = vmatprep.subr.mxu0 0.0
  %12050 = vmatpush1.msra.mxu0 %v12005
  %12051 = vmatprep.subr.mxu0 0.0
  %12052 = vmatpush1.msra.mxu0 %v12004
  %12053 = vmatprep.subr.mxu0 0.0
  %12054 = vmatpush1.msra.mxu0 %v12003
  %12055 = vmatprep.subr.mxu0 0.0
  %12056 = vmatpush1.msra.mxu0 %v12002
  %12057 = vmatprep.subr.mxu0 0.0
  %12058 = vmatpush2.msra.mxu0 0.0
  %12059 = vmatprep.subr.mxu0 0.0
  %12060 = vmatpush2.msra.mxu0 0.0
  %12061 = vmatprep.subr.mxu0 0.0
  %12062 = vmatpush2.msra.mxu0 0.0
  %12063 = vmatprep.subr.mxu0 0.0
  %12064 = vmatpush2.msra.mxu0 0.0
  %12065 = vmatprep.subr.mxu0 0.0
  %12066 = vmatpush2.msra.mxu0 0.0
  %12067 = vmatprep.subr.mxu0 0.0
  %12068 = vmatpush2.msra.mxu0 0.0
  %12069 = vmatprep.subr.mxu0 0.0
  %12070 = vmatpush2.msra.mxu0 0.0
  %12071 = vmatprep.subr.mxu0 0.0
  %12072 = vmatpush2.msra.mxu0 0.0
  %12073 = vmatprep.subr.mxu0 0.0
  %12074 = vmatpush2.msra.mxu0 0.0
  %12075 = vmatprep.subr.mxu0 0.0
  %12076 = vmatpush2.msra.mxu0 0.0
  %12077 = vmatprep.subr.mxu0 0.0
  %12078 = vmatpush2.msra.mxu0 0.0
  %12079 = vmatprep.subr.mxu0 0.0
  %12080 = vmatpush2.msra.mxu0 0.0
  %12081 = vmatprep.subr.mxu0 0.0
  %12082 = vmatpush2.msra.mxu0 0.0
  %12083 = vmatprep.subr.mxu0 0.0
  %12084 = vmatpush2.msra.mxu0 0.0
  %12085 = vmatprep.subr.mxu0 0.0
  %12086 = vmatpush2.msra.mxu0 0.0
  %12087 = vmatprep.subr.mxu0 0.0
  %12088 = vmatpush2.msra.mxu0 0.0
  %12089 = vmatprep.mubr.f32.mxu0 0.0
  %12090 = vmatmul.mubr.f32.gmra.mxu0 %v12001
  %v12091 = vpop.f32.mrf.mxu0
  %v12092 = vadd.f32 %v12023, %v12091
  %v12093 = vpop.f32.mrf.mxu0
  %12094 = vdwg.mxu0
  %12095 = vst [vmem:[%s12] sm:$0xff] %v12092
  // Predicated region
  $region50: #{_lenet5_forward.1} parent=0 // pred_check
    _
  $region51: #{_lenet5_forward.1} parent=0 // pred_check_branch
    %12097 = sbr.rel (0) target = $region53
  $region52: #{_lenet5_forward.1} parent=0 // pred_region
    _
  $region53: #{_lenet5_forward.1} parent=0 // pred_fallthru
    _
  // Predicated region
  $region54: #{_lenet5_forward.1} parent=0 // pred_check
    _
  $region55: #{_lenet5_forward.1} parent=0 // pred_check_branch
    %12099 = sbr.rel (0) target = $region57
  $region56: #{_lenet5_forward.1} parent=0 // pred_region
    _
  $region57: #{_lenet5_forward.1} parent=0 // pred_fallthru
    _

</llo_original>
